<compile_context>
chip_gen: v7x
topology: tpu7x:2x2x1
jax: 0.10.0
libtpu: 0.0.40
codegen_flags: <defaults>
</compile_context>

<pallas_src>
import jax
import jax.numpy as jnp
from jax import lax
from jax.experimental import pallas as pl
from jax.experimental.pallas import tpu as pltpu

EPS = 1e-5
# Set to jnp.bfloat16 on v6e/v7x for real channel counts (MXU runs 2x faster on
# bf16 there); f32 here keeps the tight correctness check and C=4 is VPU-bound.
MXU_DTYPE = jnp.float32


def basic_block_kernel(x_ref, w1_ref, w2_ref, g1_ref, b1_ref, g2_ref, b2_ref,
                       out_ref, pad_ref):
    # x_ref   : (N, H, W, C)       unpadded NHWC input (also the residual)
    # w*_ref  : (3, 3, C, C)       conv weights (kH, kW, Cin, Cout)
    # g*/b*   : (1, C)             BN gamma / beta
    # out_ref : (N, H, W, C)
    # pad_ref : (N, H+2, W+2, C)   VMEM scratch, shared halo buffer (both convs)
    N, H, W, C = x_ref.shape
    Hp, Wp = H + 2, W + 2
    M = N * H * W
    inv_m = 1.0 / M

    w1 = w1_ref[...].astype(MXU_DTYPE)
    w2 = w2_ref[...].astype(MXU_DTYPE)

    # Zero only the 1-px border of the shared halo scratch (once; both convs
    # overwrite only the interior afterwards, so the border stays zero).
    zrow = jnp.zeros((N, 1, Wp, C), jnp.float32)
    zcol = jnp.zeros((N, Hp, 1, C), jnp.float32)
    pad_ref[:, 0:1, :, :] = zrow
    pad_ref[:, Hp - 1:Hp, :, :] = zrow
    pad_ref[:, :, 0:1, :] = zcol
    pad_ref[:, :, Wp - 1:Wp, :] = zcol

    def conv3x3(w):
        # 3x3 / stride 1 / pad 1 conv of the scratch interior, as 9
        # accumulating (M, C) x (C, C) matmuls whose shifted inputs are read
        # directly as static Ref slices of the padded scratch (no shifted
        # value copies).  For real ResNet channel counts prefer the im2col
        # form ((M, 9C) x (9C, C), bf16 inputs) to cut MXU pushes 9x.
        acc = jnp.zeros((M, C), jnp.float32)
        for ky in range(3):
            for kx in range(3):
                tap = pad_ref[:, ky:ky + H, kx:kx + W, :]
                tap = tap.reshape(M, C).astype(MXU_DTYPE)
                acc = acc + jnp.dot(tap, w[ky, kx],
                                    preferred_element_type=jnp.float32)
        return acc

    def bn_scale_shift(acc, g_ref, b_ref):
        # Training-mode BN (biased variance) in one sweep: per-channel sum and
        # sum-of-squares, affine folded into a single scale/shift pair.
        s = jnp.sum(acc, axis=0, keepdims=True)
        ss = jnp.sum(acc * acc, axis=0, keepdims=True)
        mean = s * inv_m
        var = ss * inv_m - mean * mean            # f32; fine at these scales
        scale = g_ref[...] * lax.rsqrt(var + EPS)  # EUP rsqrt (free slot)
        shift = b_ref[...] - mean * scale
        return scale, shift

    # ---- conv1 -> bn1 -> relu -------------------------------------------
    pad_ref[:, 1:1 + H, 1:1 + W, :] = x_ref[...].astype(jnp.float32)
    acc1 = conv3x3(w1)
    scale1, shift1 = bn_scale_shift(acc1, g1_ref, b1_ref)
    h = jnp.maximum(acc1 * scale1 + shift1, 0.0)

    # ---- conv2 (reuse same halo scratch) -> bn2 -> +residual -> relu -----
    pad_ref[:, 1:1 + H, 1:1 + W, :] = h.reshape(N, H, W, C)
    acc2 = conv3x3(w2)
    scale2, shift2 = bn_scale_shift(acc2, g2_ref, b2_ref)
    res = x_ref[...].astype(jnp.float32).reshape(M, C)
    o = jnp.maximum(acc2 * scale2 + shift2 + res, 0.0)

    out_ref[...] = o.reshape(N, H, W, C).astype(out_ref.dtype)


def _cost_estimate(N, H, W, C):
    M = N * H * W
    conv_flops = 2 * (2 * M * 9 * C * C)      # two 3x3 convs (MAC = 2 flops)
    ew_flops = 12 * M * C                     # BN normalize / relu / residual
    bytes_accessed = 4 * (2 * M * C           # x in, out
                          + 2 * 9 * C * C     # weights
                          + 4 * C)            # BN params
    return pl.CostEstimate(flops=conv_flops + ew_flops,
                           transcendentals=2 * C,
                           bytes_accessed=bytes_accessed)


@jax.jit
def basic_block_forward(x_nchw, w1, w2, g1, b1, g2, b2):
    """x_nchw: (N, C, H, W) float32.  Returns (N, C, H, W)."""
    # TODO(synk): stride != 1 / downsample path not implemented -- the PyTorch
    # module's residual add is only shape-consistent for inplanes == planes,
    # stride == 1, downsample=None, which is the config implemented here.
    x = jnp.transpose(x_nchw, (0, 2, 3, 1))          # NCHW -> NHWC (layout only)
    N, H, W, C = x.shape

    vmem = pl.BlockSpec(memory_space=pltpu.MemorySpace.VMEM)
    out = pl.pallas_call(
        basic_block_kernel,
        out_shape=jax.ShapeDtypeStruct((N, H, W, C), x.dtype),
        in_specs=[vmem] * 7,
        out_specs=vmem,
        scratch_shapes=[pltpu.VMEM((N, H + 2, W + 2, C), jnp.float32)],
        compiler_params=pltpu.CompilerParams(
            # Whole problem is VMEM-resident at these shapes; 32 MiB is within
            # every generation's scoped limit (incl. v7x's 64 MiB VMEM).
            vmem_limit_bytes=32 * 1024 * 1024),
        cost_estimate=_cost_estimate(N, H, W, C),
    )(x, w1, w2,
      g1.reshape(1, C), b1.reshape(1, C), g2.reshape(1, C), b2.reshape(1, C))

    return jnp.transpose(out, (0, 3, 1, 2))          # NHWC -> NCHW


def reference_forward(x_nchw, w1, w2, g1, b1, g2, b2):
    """Pure-JAX reference (NHWC conv + training-mode BN)."""
    x = jnp.transpose(x_nchw, (0, 2, 3, 1))
    dn = lax.conv_dimension_numbers(x.shape, w1.shape, ("NHWC", "HWIO", "NHWC"))

    def bn(y, g, b):
        m = jnp.mean(y, axis=(0, 1, 2), keepdims=True)
        v = jnp.mean((y - m) ** 2, axis=(0, 1, 2), keepdims=True)
        return (y - m) * lax.rsqrt(v + EPS) * g + b

    out = lax.conv_general_dilated(x, w1, (1, 1), ((1, 1), (1, 1)),
                                   dimension_numbers=dn)
    out = jnp.maximum(bn(out, g1, b1), 0.0)
    out = lax.conv_general_dilated(out, w2, (1, 1), ((1, 1), (1, 1)),
                                   dimension_numbers=dn)
    out = bn(out, g2, b2) + x
    out = jnp.maximum(out, 0.0)
    return jnp.transpose(out, (0, 3, 1, 2))


if __name__ == "__main__":
    # Small shapes: inplanes == planes == 4, stride == 1, no downsample.
    N, C, H, W = 2, 4, 16, 16

    key = jax.random.PRNGKey(0)
    kx, kw1, kw2, kg1, kb1, kg2, kb2 = jax.random.split(key, 7)

    x = jax.random.normal(kx, (N, C, H, W), jnp.float32)
    # Conv weights in HWIO (kH, kW, Cin, Cout); deterministic synthetic init.
    w1 = jax.random.normal(kw1, (3, 3, C, C), jnp.float32) * 0.1
    w2 = jax.random.normal(kw2, (3, 3, C, C), jnp.float32) * 0.1
    # BN affine params (PyTorch default is gamma=1, beta=0; perturb a bit).
    g1 = 1.0 + 0.1 * jax.random.normal(kg1, (C,), jnp.float32)
    b1 = 0.1 * jax.random.normal(kb1, (C,), jnp.float32)
    g2 = 1.0 + 0.1 * jax.random.normal(kg2, (C,), jnp.float32)
    b2 = 0.1 * jax.random.normal(kb2, (C,), jnp.float32)

    y = basic_block_forward(x, w1, w2, g1, b1, g2, b2)
    y = jax.block_until_ready(y)

    y_ref = reference_forward(x, w1, w2, g1, b1, g2, b2)
    assert y.shape == (N, C, H, W)
    assert jnp.allclose(y, y_ref, atol=1e-4, rtol=1e-4), float(
        jnp.max(jnp.abs(y - y_ref)))

    print("KERNEL_OK")
</pallas_src>

<mosaic_0001>
module attributes {stable_mosaic.version = 11 : i64} {
  func.func @basic_block_kernel(%arg0: memref<2x16x16x4xf32, #tpu.memory_space<vmem>>, %arg1: memref<3x3x4x4xf32, #tpu.memory_space<vmem>>, %arg2: memref<3x3x4x4xf32, #tpu.memory_space<vmem>>, %arg3: memref<1x4xf32, #tpu.memory_space<vmem>>, %arg4: memref<1x4xf32, #tpu.memory_space<vmem>>, %arg5: memref<1x4xf32, #tpu.memory_space<vmem>>, %arg6: memref<1x4xf32, #tpu.memory_space<vmem>>, %arg7: memref<2x16x16x4xf32, #tpu.memory_space<vmem>>, %arg8: memref<2x18x18x4xf32, #tpu.memory_space<vmem>>) attributes {dimension_semantics = [], scalar_prefetch = 0 : i64, scratch_operands = 1 : i64, tpu.core_type = #tpu.core_type<tc>} {
    %c0 = arith.constant 0 : index
    %c0_0 = arith.constant 0 : index
    %c0_1 = arith.constant 0 : index
    %c0_2 = arith.constant 0 : index
    %0 = vector.load %arg1[%c0, %c0_0, %c0_1, %c0_2] : memref<3x3x4x4xf32, #tpu.memory_space<vmem>>, vector<3x3x4x4xf32>
    %c0_3 = arith.constant 0 : index
    %c0_4 = arith.constant 0 : index
    %c0_5 = arith.constant 0 : index
    %c0_6 = arith.constant 0 : index
    %1 = vector.load %arg2[%c0_3, %c0_4, %c0_5, %c0_6] : memref<3x3x4x4xf32, #tpu.memory_space<vmem>>, vector<3x3x4x4xf32>
    %cst = arith.constant 0.000000e+00 : f32
    %2 = vector.broadcast %cst : f32 to vector<2x1x18x4xf32>
    %cst_7 = arith.constant 0.000000e+00 : f32
    %3 = vector.broadcast %cst_7 : f32 to vector<2x18x1x4xf32>
    %c0_8 = arith.constant 0 : index
    %c0_9 = arith.constant 0 : index
    %c0_10 = arith.constant 0 : index
    %c0_11 = arith.constant 0 : index
    %4 = vector.load %arg8[%c0_8, %c0_9, %c0_10, %c0_11] : memref<2x18x18x4xf32, #tpu.memory_space<vmem>>, vector<2x1x18x4xf32>
    tpu.vector_store %arg8[%c0_8, %c0_9, %c0_10, %c0_11], %2 {strides = array<i32>} : memref<2x18x18x4xf32, #tpu.memory_space<vmem>>, vector<2x1x18x4xf32>,
    %c0_12 = arith.constant 0 : index
    %c17 = arith.constant 17 : index
    %c0_13 = arith.constant 0 : index
    %c0_14 = arith.constant 0 : index
    %5 = vector.load %arg8[%c0_12, %c17, %c0_13, %c0_14] : memref<2x18x18x4xf32, #tpu.memory_space<vmem>>, vector<2x1x18x4xf32>
    tpu.vector_store %arg8[%c0_12, %c17, %c0_13, %c0_14], %2 {strides = array<i32>} : memref<2x18x18x4xf32, #tpu.memory_space<vmem>>, vector<2x1x18x4xf32>,
    %c0_15 = arith.constant 0 : index
    %c0_16 = arith.constant 0 : index
    %c0_17 = arith.constant 0 : index
    %c0_18 = arith.constant 0 : index
    %6 = vector.load %arg8[%c0_15, %c0_16, %c0_17, %c0_18] : memref<2x18x18x4xf32, #tpu.memory_space<vmem>>, vector<2x18x1x4xf32>
    tpu.vector_store %arg8[%c0_15, %c0_16, %c0_17, %c0_18], %3 {strides = array<i32>} : memref<2x18x18x4xf32, #tpu.memory_space<vmem>>, vector<2x18x1x4xf32>,
    %c0_19 = arith.constant 0 : index
    %c0_20 = arith.constant 0 : index
    %c17_21 = arith.constant 17 : index
    %c0_22 = arith.constant 0 : index
    %7 = vector.load %arg8[%c0_19, %c0_20, %c17_21, %c0_22] : memref<2x18x18x4xf32, #tpu.memory_space<vmem>>, vector<2x18x1x4xf32>
    tpu.vector_store %arg8[%c0_19, %c0_20, %c17_21, %c0_22], %3 {strides = array<i32>} : memref<2x18x18x4xf32, #tpu.memory_space<vmem>>, vector<2x18x1x4xf32>,
    %c0_23 = arith.constant 0 : index
    %c0_24 = arith.constant 0 : index
    %c0_25 = arith.constant 0 : index
    %c0_26 = arith.constant 0 : index
    %8 = vector.load %arg0[%c0_23, %c0_24, %c0_25, %c0_26] : memref<2x16x16x4xf32, #tpu.memory_space<vmem>>, vector<2x16x16x4xf32>
    %c0_27 = arith.constant 0 : index
    %c1 = arith.constant 1 : index
    %c1_28 = arith.constant 1 : index
    %c0_29 = arith.constant 0 : index
    %9 = vector.load %arg8[%c0_27, %c1, %c1_28, %c0_29] : memref<2x18x18x4xf32, #tpu.memory_space<vmem>>, vector<2x16x16x4xf32>
    tpu.vector_store %arg8[%c0_27, %c1, %c1_28, %c0_29], %8 {strides = array<i32>} : memref<2x18x18x4xf32, #tpu.memory_space<vmem>>, vector<2x16x16x4xf32>,
    %cst_30 = arith.constant 0.000000e+00 : f32
    %10 = vector.broadcast %cst_30 : f32 to vector<512x4xf32>
    %c0_31 = arith.constant 0 : index
    %c0_32 = arith.constant 0 : index
    %c0_33 = arith.constant 0 : index
    %c0_34 = arith.constant 0 : index
    %11 = vector.load %arg8[%c0_31, %c0_32, %c0_33, %c0_34] : memref<2x18x18x4xf32, #tpu.memory_space<vmem>>, vector<2x16x16x4xf32>
    %12 = vector.shape_cast %11 : vector<2x16x16x4xf32> to vector<512x4xf32>
    %13 = vector.extract_strided_slice %0 {offsets = [0, 0, 0, 0], sizes = [1, 1, 4, 4], strides = [1, 1, 1, 1]} : vector<3x3x4x4xf32> to vector<1x1x4x4xf32>
    %14 = vector.shape_cast %13 : vector<1x1x4x4xf32> to vector<4x4xf32>
    %cst_35 = arith.constant dense<0.000000e+00> : vector<512x4xf32>
    %15 = tpu.matmul %12, %14, %cst_35 {dimension_numbers = #tpu.dot_dimension_numbers<[1], [0], [0], [1], [0, 0, 1, 1], [], []>} : vector<512x4xf32>, vector<4x4xf32>, vector<512x4xf32> -> vector<512x4xf32>
    %16 = arith.addf %10, %15 : vector<512x4xf32>
    %c0_36 = arith.constant 0 : index
    %c0_37 = arith.constant 0 : index
    %c1_38 = arith.constant 1 : index
    %c0_39 = arith.constant 0 : index
    %17 = vector.load %arg8[%c0_36, %c0_37, %c1_38, %c0_39] : memref<2x18x18x4xf32, #tpu.memory_space<vmem>>, vector<2x16x16x4xf32>
    %18 = vector.shape_cast %17 : vector<2x16x16x4xf32> to vector<512x4xf32>
    %19 = vector.extract_strided_slice %0 {offsets = [0, 1, 0, 0], sizes = [1, 1, 4, 4], strides = [1, 1, 1, 1]} : vector<3x3x4x4xf32> to vector<1x1x4x4xf32>
    %20 = vector.shape_cast %19 : vector<1x1x4x4xf32> to vector<4x4xf32>
    %cst_40 = arith.constant dense<0.000000e+00> : vector<512x4xf32>
    %21 = tpu.matmul %18, %20, %cst_40 {dimension_numbers = #tpu.dot_dimension_numbers<[1], [0], [0], [1], [0, 0, 1, 1], [], []>} : vector<512x4xf32>, vector<4x4xf32>, vector<512x4xf32> -> vector<512x4xf32>
    %22 = arith.addf %16, %21 : vector<512x4xf32>
    %c0_41 = arith.constant 0 : index
    %c0_42 = arith.constant 0 : index
    %c2 = arith.constant 2 : index
    %c0_43 = arith.constant 0 : index
    %23 = vector.load %arg8[%c0_41, %c0_42, %c2, %c0_43] : memref<2x18x18x4xf32, #tpu.memory_space<vmem>>, vector<2x16x16x4xf32>
    %24 = vector.shape_cast %23 : vector<2x16x16x4xf32> to vector<512x4xf32>
    %25 = vector.extract_strided_slice %0 {offsets = [0, 2, 0, 0], sizes = [1, 1, 4, 4], strides = [1, 1, 1, 1]} : vector<3x3x4x4xf32> to vector<1x1x4x4xf32>
    %26 = vector.shape_cast %25 : vector<1x1x4x4xf32> to vector<4x4xf32>
    %cst_44 = arith.constant dense<0.000000e+00> : vector<512x4xf32>
    %27 = tpu.matmul %24, %26, %cst_44 {dimension_numbers = #tpu.dot_dimension_numbers<[1], [0], [0], [1], [0, 0, 1, 1], [], []>} : vector<512x4xf32>, vector<4x4xf32>, vector<512x4xf32> -> vector<512x4xf32>
    %28 = arith.addf %22, %27 : vector<512x4xf32>
    %c0_45 = arith.constant 0 : index
    %c1_46 = arith.constant 1 : index
    %c0_47 = arith.constant 0 : index
    %c0_48 = arith.constant 0 : index
    %29 = vector.load %arg8[%c0_45, %c1_46, %c0_47, %c0_48] : memref<2x18x18x4xf32, #tpu.memory_space<vmem>>, vector<2x16x16x4xf32>
    %30 = vector.shape_cast %29 : vector<2x16x16x4xf32> to vector<512x4xf32>
    %31 = vector.extract_strided_slice %0 {offsets = [1, 0, 0, 0], sizes = [1, 1, 4, 4], strides = [1, 1, 1, 1]} : vector<3x3x4x4xf32> to vector<1x1x4x4xf32>
    %32 = vector.shape_cast %31 : vector<1x1x4x4xf32> to vector<4x4xf32>
    %cst_49 = arith.constant dense<0.000000e+00> : vector<512x4xf32>
    %33 = tpu.matmul %30, %32, %cst_49 {dimension_numbers = #tpu.dot_dimension_numbers<[1], [0], [0], [1], [0, 0, 1, 1], [], []>} : vector<512x4xf32>, vector<4x4xf32>, vector<512x4xf32> -> vector<512x4xf32>
    %34 = arith.addf %28, %33 : vector<512x4xf32>
    %c0_50 = arith.constant 0 : index
    %c1_51 = arith.constant 1 : index
    %c1_52 = arith.constant 1 : index
    %c0_53 = arith.constant 0 : index
    %35 = vector.load %arg8[%c0_50, %c1_51, %c1_52, %c0_53] : memref<2x18x18x4xf32, #tpu.memory_space<vmem>>, vector<2x16x16x4xf32>
    %36 = vector.shape_cast %35 : vector<2x16x16x4xf32> to vector<512x4xf32>
    %37 = vector.extract_strided_slice %0 {offsets = [1, 1, 0, 0], sizes = [1, 1, 4, 4], strides = [1, 1, 1, 1]} : vector<3x3x4x4xf32> to vector<1x1x4x4xf32>
    %38 = vector.shape_cast %37 : vector<1x1x4x4xf32> to vector<4x4xf32>
    %cst_54 = arith.constant dense<0.000000e+00> : vector<512x4xf32>
    %39 = tpu.matmul %36, %38, %cst_54 {dimension_numbers = #tpu.dot_dimension_numbers<[1], [0], [0], [1], [0, 0, 1, 1], [], []>} : vector<512x4xf32>, vector<4x4xf32>, vector<512x4xf32> -> vector<512x4xf32>
    %40 = arith.addf %34, %39 : vector<512x4xf32>
    %c0_55 = arith.constant 0 : index
    %c1_56 = arith.constant 1 : index
    %c2_57 = arith.constant 2 : index
    %c0_58 = arith.constant 0 : index
    %41 = vector.load %arg8[%c0_55, %c1_56, %c2_57, %c0_58] : memref<2x18x18x4xf32, #tpu.memory_space<vmem>>, vector<2x16x16x4xf32>
    %42 = vector.shape_cast %41 : vector<2x16x16x4xf32> to vector<512x4xf32>
    %43 = vector.extract_strided_slice %0 {offsets = [1, 2, 0, 0], sizes = [1, 1, 4, 4], strides = [1, 1, 1, 1]} : vector<3x3x4x4xf32> to vector<1x1x4x4xf32>
    %44 = vector.shape_cast %43 : vector<1x1x4x4xf32> to vector<4x4xf32>
    %cst_59 = arith.constant dense<0.000000e+00> : vector<512x4xf32>
    %45 = tpu.matmul %42, %44, %cst_59 {dimension_numbers = #tpu.dot_dimension_numbers<[1], [0], [0], [1], [0, 0, 1, 1], [], []>} : vector<512x4xf32>, vector<4x4xf32>, vector<512x4xf32> -> vector<512x4xf32>
    %46 = arith.addf %40, %45 : vector<512x4xf32>
    %c0_60 = arith.constant 0 : index
    %c2_61 = arith.constant 2 : index
    %c0_62 = arith.constant 0 : index
    %c0_63 = arith.constant 0 : index
    %47 = vector.load %arg8[%c0_60, %c2_61, %c0_62, %c0_63] : memref<2x18x18x4xf32, #tpu.memory_space<vmem>>, vector<2x16x16x4xf32>
    %48 = vector.shape_cast %47 : vector<2x16x16x4xf32> to vector<512x4xf32>
    %49 = vector.extract_strided_slice %0 {offsets = [2, 0, 0, 0], sizes = [1, 1, 4, 4], strides = [1, 1, 1, 1]} : vector<3x3x4x4xf32> to vector<1x1x4x4xf32>
    %50 = vector.shape_cast %49 : vector<1x1x4x4xf32> to vector<4x4xf32>
    %cst_64 = arith.constant dense<0.000000e+00> : vector<512x4xf32>
    %51 = tpu.matmul %48, %50, %cst_64 {dimension_numbers = #tpu.dot_dimension_numbers<[1], [0], [0], [1], [0, 0, 1, 1], [], []>} : vector<512x4xf32>, vector<4x4xf32>, vector<512x4xf32> -> vector<512x4xf32>
    %52 = arith.addf %46, %51 : vector<512x4xf32>
    %c0_65 = arith.constant 0 : index
    %c2_66 = arith.constant 2 : index
    %c1_67 = arith.constant 1 : index
    %c0_68 = arith.constant 0 : index
    %53 = vector.load %arg8[%c0_65, %c2_66, %c1_67, %c0_68] : memref<2x18x18x4xf32, #tpu.memory_space<vmem>>, vector<2x16x16x4xf32>
    %54 = vector.shape_cast %53 : vector<2x16x16x4xf32> to vector<512x4xf32>
    %55 = vector.extract_strided_slice %0 {offsets = [2, 1, 0, 0], sizes = [1, 1, 4, 4], strides = [1, 1, 1, 1]} : vector<3x3x4x4xf32> to vector<1x1x4x4xf32>
    %56 = vector.shape_cast %55 : vector<1x1x4x4xf32> to vector<4x4xf32>
    %cst_69 = arith.constant dense<0.000000e+00> : vector<512x4xf32>
    %57 = tpu.matmul %54, %56, %cst_69 {dimension_numbers = #tpu.dot_dimension_numbers<[1], [0], [0], [1], [0, 0, 1, 1], [], []>} : vector<512x4xf32>, vector<4x4xf32>, vector<512x4xf32> -> vector<512x4xf32>
    %58 = arith.addf %52, %57 : vector<512x4xf32>
    %c0_70 = arith.constant 0 : index
    %c2_71 = arith.constant 2 : index
    %c2_72 = arith.constant 2 : index
    %c0_73 = arith.constant 0 : index
    %59 = vector.load %arg8[%c0_70, %c2_71, %c2_72, %c0_73] : memref<2x18x18x4xf32, #tpu.memory_space<vmem>>, vector<2x16x16x4xf32>
    %60 = vector.shape_cast %59 : vector<2x16x16x4xf32> to vector<512x4xf32>
    %61 = vector.extract_strided_slice %0 {offsets = [2, 2, 0, 0], sizes = [1, 1, 4, 4], strides = [1, 1, 1, 1]} : vector<3x3x4x4xf32> to vector<1x1x4x4xf32>
    %62 = vector.shape_cast %61 : vector<1x1x4x4xf32> to vector<4x4xf32>
    %cst_74 = arith.constant dense<0.000000e+00> : vector<512x4xf32>
    %63 = tpu.matmul %60, %62, %cst_74 {dimension_numbers = #tpu.dot_dimension_numbers<[1], [0], [0], [1], [0, 0, 1, 1], [], []>} : vector<512x4xf32>, vector<4x4xf32>, vector<512x4xf32> -> vector<512x4xf32>
    %64 = arith.addf %58, %63 : vector<512x4xf32>
    %cst_75 = arith.constant dense<0.000000e+00> : vector<4xf32>
    %65 = vector.multi_reduction <add>, %64, %cst_75 [0] : vector<512x4xf32> to vector<4xf32>
    %66 = vector.shape_cast %65 : vector<4xf32> to vector<1x4xf32>
    %67 = arith.mulf %64, %64 : vector<512x4xf32>
    %cst_76 = arith.constant dense<0.000000e+00> : vector<4xf32>
    %68 = vector.multi_reduction <add>, %67, %cst_76 [0] : vector<512x4xf32> to vector<4xf32>
    %69 = vector.shape_cast %68 : vector<4xf32> to vector<1x4xf32>
    %cst_77 = arith.constant 0.001953125 : f32
    %70 = vector.broadcast %cst_77 : f32 to vector<1x4xf32>
    %71 = arith.mulf %66, %70 : vector<1x4xf32>
    %cst_78 = arith.constant 0.001953125 : f32
    %72 = vector.broadcast %cst_78 : f32 to vector<1x4xf32>
    %73 = arith.mulf %69, %72 : vector<1x4xf32>
    %74 = arith.mulf %71, %71 : vector<1x4xf32>
    %75 = arith.subf %73, %74 : vector<1x4xf32>
    %c0_79 = arith.constant 0 : index
    %c0_80 = arith.constant 0 : index
    %76 = vector.load %arg3[%c0_79, %c0_80] : memref<1x4xf32, #tpu.memory_space<vmem>>, vector<1x4xf32>
    %cst_81 = arith.constant 9.99999974E-6 : f32
    %77 = vector.broadcast %cst_81 : f32 to vector<1x4xf32>
    %78 = arith.addf %75, %77 : vector<1x4xf32>
    %79 = math.rsqrt %78 : vector<1x4xf32>
    %80 = arith.mulf %76, %79 : vector<1x4xf32>
    %c0_82 = arith.constant 0 : index
    %c0_83 = arith.constant 0 : index
    %81 = vector.load %arg4[%c0_82, %c0_83] : memref<1x4xf32, #tpu.memory_space<vmem>>, vector<1x4xf32>
    %82 = arith.mulf %71, %80 : vector<1x4xf32>
    %83 = arith.subf %81, %82 : vector<1x4xf32>
    %84 = vector.broadcast %80 : vector<1x4xf32> to vector<512x4xf32>
    %85 = arith.mulf %64, %84 : vector<512x4xf32>
    %86 = vector.broadcast %83 : vector<1x4xf32> to vector<512x4xf32>
    %87 = arith.addf %85, %86 : vector<512x4xf32>
    %cst_84 = arith.constant 0.000000e+00 : f32
    %88 = vector.broadcast %cst_84 : f32 to vector<512x4xf32>
    %89 = arith.maximumf %87, %88 : vector<512x4xf32>
    %90 = vector.shape_cast %89 : vector<512x4xf32> to vector<2x16x16x4xf32>
    %c0_85 = arith.constant 0 : index
    %c1_86 = arith.constant 1 : index
    %c1_87 = arith.constant 1 : index
    %c0_88 = arith.constant 0 : index
    %91 = vector.load %arg8[%c0_85, %c1_86, %c1_87, %c0_88] : memref<2x18x18x4xf32, #tpu.memory_space<vmem>>, vector<2x16x16x4xf32>
    tpu.vector_store %arg8[%c0_85, %c1_86, %c1_87, %c0_88], %90 {strides = array<i32>} : memref<2x18x18x4xf32, #tpu.memory_space<vmem>>, vector<2x16x16x4xf32>,
    %cst_89 = arith.constant 0.000000e+00 : f32
    %92 = vector.broadcast %cst_89 : f32 to vector<512x4xf32>
    %c0_90 = arith.constant 0 : index
    %c0_91 = arith.constant 0 : index
    %c0_92 = arith.constant 0 : index
    %c0_93 = arith.constant 0 : index
    %93 = vector.load %arg8[%c0_90, %c0_91, %c0_92, %c0_93] : memref<2x18x18x4xf32, #tpu.memory_space<vmem>>, vector<2x16x16x4xf32>
    %94 = vector.shape_cast %93 : vector<2x16x16x4xf32> to vector<512x4xf32>
    %95 = vector.extract_strided_slice %1 {offsets = [0, 0, 0, 0], sizes = [1, 1, 4, 4], strides = [1, 1, 1, 1]} : vector<3x3x4x4xf32> to vector<1x1x4x4xf32>
    %96 = vector.shape_cast %95 : vector<1x1x4x4xf32> to vector<4x4xf32>
    %cst_94 = arith.constant dense<0.000000e+00> : vector<512x4xf32>
    %97 = tpu.matmul %94, %96, %cst_94 {dimension_numbers = #tpu.dot_dimension_numbers<[1], [0], [0], [1], [0, 0, 1, 1], [], []>} : vector<512x4xf32>, vector<4x4xf32>, vector<512x4xf32> -> vector<512x4xf32>
    %98 = arith.addf %92, %97 : vector<512x4xf32>
    %c0_95 = arith.constant 0 : index
    %c0_96 = arith.constant 0 : index
    %c1_97 = arith.constant 1 : index
    %c0_98 = arith.constant 0 : index
    %99 = vector.load %arg8[%c0_95, %c0_96, %c1_97, %c0_98] : memref<2x18x18x4xf32, #tpu.memory_space<vmem>>, vector<2x16x16x4xf32>
    %100 = vector.shape_cast %99 : vector<2x16x16x4xf32> to vector<512x4xf32>
    %101 = vector.extract_strided_slice %1 {offsets = [0, 1, 0, 0], sizes = [1, 1, 4, 4], strides = [1, 1, 1, 1]} : vector<3x3x4x4xf32> to vector<1x1x4x4xf32>
    %102 = vector.shape_cast %101 : vector<1x1x4x4xf32> to vector<4x4xf32>
    %cst_99 = arith.constant dense<0.000000e+00> : vector<512x4xf32>
    %103 = tpu.matmul %100, %102, %cst_99 {dimension_numbers = #tpu.dot_dimension_numbers<[1], [0], [0], [1], [0, 0, 1, 1], [], []>} : vector<512x4xf32>, vector<4x4xf32>, vector<512x4xf32> -> vector<512x4xf32>
    %104 = arith.addf %98, %103 : vector<512x4xf32>
    %c0_100 = arith.constant 0 : index
    %c0_101 = arith.constant 0 : index
    %c2_102 = arith.constant 2 : index
    %c0_103 = arith.constant 0 : index
    %105 = vector.load %arg8[%c0_100, %c0_101, %c2_102, %c0_103] : memref<2x18x18x4xf32, #tpu.memory_space<vmem>>, vector<2x16x16x4xf32>
    %106 = vector.shape_cast %105 : vector<2x16x16x4xf32> to vector<512x4xf32>
    %107 = vector.extract_strided_slice %1 {offsets = [0, 2, 0, 0], sizes = [1, 1, 4, 4], strides = [1, 1, 1, 1]} : vector<3x3x4x4xf32> to vector<1x1x4x4xf32>
    %108 = vector.shape_cast %107 : vector<1x1x4x4xf32> to vector<4x4xf32>
    %cst_104 = arith.constant dense<0.000000e+00> : vector<512x4xf32>
    %109 = tpu.matmul %106, %108, %cst_104 {dimension_numbers = #tpu.dot_dimension_numbers<[1], [0], [0], [1], [0, 0, 1, 1], [], []>} : vector<512x4xf32>, vector<4x4xf32>, vector<512x4xf32> -> vector<512x4xf32>
    %110 = arith.addf %104, %109 : vector<512x4xf32>
    %c0_105 = arith.constant 0 : index
    %c1_106 = arith.constant 1 : index
    %c0_107 = arith.constant 0 : index
    %c0_108 = arith.constant 0 : index
    %111 = vector.load %arg8[%c0_105, %c1_106, %c0_107, %c0_108] : memref<2x18x18x4xf32, #tpu.memory_space<vmem>>, vector<2x16x16x4xf32>
    %112 = vector.shape_cast %111 : vector<2x16x16x4xf32> to vector<512x4xf32>
    %113 = vector.extract_strided_slice %1 {offsets = [1, 0, 0, 0], sizes = [1, 1, 4, 4], strides = [1, 1, 1, 1]} : vector<3x3x4x4xf32> to vector<1x1x4x4xf32>
    %114 = vector.shape_cast %113 : vector<1x1x4x4xf32> to vector<4x4xf32>
    %cst_109 = arith.constant dense<0.000000e+00> : vector<512x4xf32>
    %115 = tpu.matmul %112, %114, %cst_109 {dimension_numbers = #tpu.dot_dimension_numbers<[1], [0], [0], [1], [0, 0, 1, 1], [], []>} : vector<512x4xf32>, vector<4x4xf32>, vector<512x4xf32> -> vector<512x4xf32>
    %116 = arith.addf %110, %115 : vector<512x4xf32>
    %c0_110 = arith.constant 0 : index
    %c1_111 = arith.constant 1 : index
    %c1_112 = arith.constant 1 : index
    %c0_113 = arith.constant 0 : index
    %117 = vector.load %arg8[%c0_110, %c1_111, %c1_112, %c0_113] : memref<2x18x18x4xf32, #tpu.memory_space<vmem>>, vector<2x16x16x4xf32>
    %118 = vector.shape_cast %117 : vector<2x16x16x4xf32> to vector<512x4xf32>
    %119 = vector.extract_strided_slice %1 {offsets = [1, 1, 0, 0], sizes = [1, 1, 4, 4], strides = [1, 1, 1, 1]} : vector<3x3x4x4xf32> to vector<1x1x4x4xf32>
    %120 = vector.shape_cast %119 : vector<1x1x4x4xf32> to vector<4x4xf32>
    %cst_114 = arith.constant dense<0.000000e+00> : vector<512x4xf32>
    %121 = tpu.matmul %118, %120, %cst_114 {dimension_numbers = #tpu.dot_dimension_numbers<[1], [0], [0], [1], [0, 0, 1, 1], [], []>} : vector<512x4xf32>, vector<4x4xf32>, vector<512x4xf32> -> vector<512x4xf32>
    %122 = arith.addf %116, %121 : vector<512x4xf32>
    %c0_115 = arith.constant 0 : index
    %c1_116 = arith.constant 1 : index
    %c2_117 = arith.constant 2 : index
    %c0_118 = arith.constant 0 : index
    %123 = vector.load %arg8[%c0_115, %c1_116, %c2_117, %c0_118] : memref<2x18x18x4xf32, #tpu.memory_space<vmem>>, vector<2x16x16x4xf32>
    %124 = vector.shape_cast %123 : vector<2x16x16x4xf32> to vector<512x4xf32>
    %125 = vector.extract_strided_slice %1 {offsets = [1, 2, 0, 0], sizes = [1, 1, 4, 4], strides = [1, 1, 1, 1]} : vector<3x3x4x4xf32> to vector<1x1x4x4xf32>
    %126 = vector.shape_cast %125 : vector<1x1x4x4xf32> to vector<4x4xf32>
    %cst_119 = arith.constant dense<0.000000e+00> : vector<512x4xf32>
    %127 = tpu.matmul %124, %126, %cst_119 {dimension_numbers = #tpu.dot_dimension_numbers<[1], [0], [0], [1], [0, 0, 1, 1], [], []>} : vector<512x4xf32>, vector<4x4xf32>, vector<512x4xf32> -> vector<512x4xf32>
    %128 = arith.addf %122, %127 : vector<512x4xf32>
    %c0_120 = arith.constant 0 : index
    %c2_121 = arith.constant 2 : index
    %c0_122 = arith.constant 0 : index
    %c0_123 = arith.constant 0 : index
    %129 = vector.load %arg8[%c0_120, %c2_121, %c0_122, %c0_123] : memref<2x18x18x4xf32, #tpu.memory_space<vmem>>, vector<2x16x16x4xf32>
    %130 = vector.shape_cast %129 : vector<2x16x16x4xf32> to vector<512x4xf32>
    %131 = vector.extract_strided_slice %1 {offsets = [2, 0, 0, 0], sizes = [1, 1, 4, 4], strides = [1, 1, 1, 1]} : vector<3x3x4x4xf32> to vector<1x1x4x4xf32>
    %132 = vector.shape_cast %131 : vector<1x1x4x4xf32> to vector<4x4xf32>
    %cst_124 = arith.constant dense<0.000000e+00> : vector<512x4xf32>
    %133 = tpu.matmul %130, %132, %cst_124 {dimension_numbers = #tpu.dot_dimension_numbers<[1], [0], [0], [1], [0, 0, 1, 1], [], []>} : vector<512x4xf32>, vector<4x4xf32>, vector<512x4xf32> -> vector<512x4xf32>
    %134 = arith.addf %128, %133 : vector<512x4xf32>
    %c0_125 = arith.constant 0 : index
    %c2_126 = arith.constant 2 : index
    %c1_127 = arith.constant 1 : index
    %c0_128 = arith.constant 0 : index
    %135 = vector.load %arg8[%c0_125, %c2_126, %c1_127, %c0_128] : memref<2x18x18x4xf32, #tpu.memory_space<vmem>>, vector<2x16x16x4xf32>
    %136 = vector.shape_cast %135 : vector<2x16x16x4xf32> to vector<512x4xf32>
    %137 = vector.extract_strided_slice %1 {offsets = [2, 1, 0, 0], sizes = [1, 1, 4, 4], strides = [1, 1, 1, 1]} : vector<3x3x4x4xf32> to vector<1x1x4x4xf32>
    %138 = vector.shape_cast %137 : vector<1x1x4x4xf32> to vector<4x4xf32>
    %cst_129 = arith.constant dense<0.000000e+00> : vector<512x4xf32>
    %139 = tpu.matmul %136, %138, %cst_129 {dimension_numbers = #tpu.dot_dimension_numbers<[1], [0], [0], [1], [0, 0, 1, 1], [], []>} : vector<512x4xf32>, vector<4x4xf32>, vector<512x4xf32> -> vector<512x4xf32>
    %140 = arith.addf %134, %139 : vector<512x4xf32>
    %c0_130 = arith.constant 0 : index
    %c2_131 = arith.constant 2 : index
    %c2_132 = arith.constant 2 : index
    %c0_133 = arith.constant 0 : index
    %141 = vector.load %arg8[%c0_130, %c2_131, %c2_132, %c0_133] : memref<2x18x18x4xf32, #tpu.memory_space<vmem>>, vector<2x16x16x4xf32>
    %142 = vector.shape_cast %141 : vector<2x16x16x4xf32> to vector<512x4xf32>
    %143 = vector.extract_strided_slice %1 {offsets = [2, 2, 0, 0], sizes = [1, 1, 4, 4], strides = [1, 1, 1, 1]} : vector<3x3x4x4xf32> to vector<1x1x4x4xf32>
    %144 = vector.shape_cast %143 : vector<1x1x4x4xf32> to vector<4x4xf32>
    %cst_134 = arith.constant dense<0.000000e+00> : vector<512x4xf32>
    %145 = tpu.matmul %142, %144, %cst_134 {dimension_numbers = #tpu.dot_dimension_numbers<[1], [0], [0], [1], [0, 0, 1, 1], [], []>} : vector<512x4xf32>, vector<4x4xf32>, vector<512x4xf32> -> vector<512x4xf32>
    %146 = arith.addf %140, %145 : vector<512x4xf32>
    %cst_135 = arith.constant dense<0.000000e+00> : vector<4xf32>
    %147 = vector.multi_reduction <add>, %146, %cst_135 [0] : vector<512x4xf32> to vector<4xf32>
    %148 = vector.shape_cast %147 : vector<4xf32> to vector<1x4xf32>
    %149 = arith.mulf %146, %146 : vector<512x4xf32>
    %cst_136 = arith.constant dense<0.000000e+00> : vector<4xf32>
    %150 = vector.multi_reduction <add>, %149, %cst_136 [0] : vector<512x4xf32> to vector<4xf32>
    %151 = vector.shape_cast %150 : vector<4xf32> to vector<1x4xf32>
    %cst_137 = arith.constant 0.001953125 : f32
    %152 = vector.broadcast %cst_137 : f32 to vector<1x4xf32>
    %153 = arith.mulf %148, %152 : vector<1x4xf32>
    %cst_138 = arith.constant 0.001953125 : f32
    %154 = vector.broadcast %cst_138 : f32 to vector<1x4xf32>
    %155 = arith.mulf %151, %154 : vector<1x4xf32>
    %156 = arith.mulf %153, %153 : vector<1x4xf32>
    %157 = arith.subf %155, %156 : vector<1x4xf32>
    %c0_139 = arith.constant 0 : index
    %c0_140 = arith.constant 0 : index
    %158 = vector.load %arg5[%c0_139, %c0_140] : memref<1x4xf32, #tpu.memory_space<vmem>>, vector<1x4xf32>
    %cst_141 = arith.constant 9.99999974E-6 : f32
    %159 = vector.broadcast %cst_141 : f32 to vector<1x4xf32>
    %160 = arith.addf %157, %159 : vector<1x4xf32>
    %161 = math.rsqrt %160 : vector<1x4xf32>
    %162 = arith.mulf %158, %161 : vector<1x4xf32>
    %c0_142 = arith.constant 0 : index
    %c0_143 = arith.constant 0 : index
    %163 = vector.load %arg6[%c0_142, %c0_143] : memref<1x4xf32, #tpu.memory_space<vmem>>, vector<1x4xf32>
    %164 = arith.mulf %153, %162 : vector<1x4xf32>
    %165 = arith.subf %163, %164 : vector<1x4xf32>
    %c0_144 = arith.constant 0 : index
    %c0_145 = arith.constant 0 : index
    %c0_146 = arith.constant 0 : index
    %c0_147 = arith.constant 0 : index
    %166 = vector.load %arg0[%c0_144, %c0_145, %c0_146, %c0_147] : memref<2x16x16x4xf32, #tpu.memory_space<vmem>>, vector<2x16x16x4xf32>
    %167 = vector.shape_cast %166 : vector<2x16x16x4xf32> to vector<512x4xf32>
    %168 = vector.broadcast %162 : vector<1x4xf32> to vector<512x4xf32>
    %169 = arith.mulf %146, %168 : vector<512x4xf32>
    %170 = vector.broadcast %165 : vector<1x4xf32> to vector<512x4xf32>
    %171 = arith.addf %169, %170 : vector<512x4xf32>
    %172 = arith.addf %171, %167 : vector<512x4xf32>
    %cst_148 = arith.constant 0.000000e+00 : f32
    %173 = vector.broadcast %cst_148 : f32 to vector<512x4xf32>
    %174 = arith.maximumf %172, %173 : vector<512x4xf32>
    %175 = vector.shape_cast %174 : vector<512x4xf32> to vector<2x16x16x4xf32>
    %c0_149 = arith.constant 0 : index
    %c0_150 = arith.constant 0 : index
    %c0_151 = arith.constant 0 : index
    %c0_152 = arith.constant 0 : index
    %176 = vector.load %arg7[%c0_149, %c0_150, %c0_151, %c0_152] : memref<2x16x16x4xf32, #tpu.memory_space<vmem>>, vector<2x16x16x4xf32>
    tpu.vector_store %arg7[%c0_149, %c0_150, %c0_151, %c0_152], %175 {strides = array<i32>} : memref<2x16x16x4xf32, #tpu.memory_space<vmem>>, vector<2x16x16x4xf32>,
    return
  }
}

</mosaic_0001>

<llo_original>
// kernel: basic_block_forward.1
$region0: #{basic_block_forward.1}
  #allocation0 [shape = 'u32[]', space=smem, size = 0x4, offset = 0x4, fixed_abs, tag = 'smem constant byte address 0x4 - core index']
  #allocation1 [shape = 'u32[144,128]{1,0:T(1,128)}', space=vmem, size = 0x12000, scoped, tag = 'internal scratch']
  #allocation2 [shape = 'f32[2,18,18,4]{3,2,1,0:T(8,128)}', space=vmem, size = 0x6c000, scoped, tag = 'scratch operand']
  %s0 = inlined_call_operand.vmem [shape: f32[2,16,16,4], index: 0, kind: input, shape index: {}]
  %s1 = inlined_call_operand.vmem [shape: f32[3,3,4,4], index: 1, kind: input, shape index: {}]
  %s2 = inlined_call_operand.vmem [shape: f32[3,3,4,4], index: 2, kind: input, shape index: {}]
  %s3 = inlined_call_operand.vmem [shape: f32[1,4], index: 3, kind: input, shape index: {}]
  %s4 = inlined_call_operand.vmem [shape: f32[1,4], index: 4, kind: input, shape index: {}]
  %s5 = inlined_call_operand.vmem [shape: f32[1,4], index: 5, kind: input, shape index: {}]
  %s6 = inlined_call_operand.vmem [shape: f32[1,4], index: 6, kind: input, shape index: {}]
  %s7 = inlined_call_operand.vmem [shape: f32[2,16,16,4], index: 7, kind: output, shape index: {}]
  %s8 = sld [smem:[#allocation0]]
  $region38: #{basic_block_forward.1} parent=0
    _
  %s10 = ssub.s32 1, %s8
  %s11 = scalar_select 0, %s10, %s8
  // Predicated region
  $region2: #{basic_block_forward.1} parent=0 // pred_check
    _
  $region3: #{basic_block_forward.1} parent=0 // pred_check_branch
    %13 = sbr.rel (0) target = $region5
  $region4: #{basic_block_forward.1} parent=0 // pred_region
    _
  $region5: #{basic_block_forward.1} parent=0 // pred_fallthru
    _
  // Predicated region
  $region6: #{basic_block_forward.1} parent=0 // pred_check
    _
  $region7: #{basic_block_forward.1} parent=0 // pred_check_branch
    %15 = sbr.rel (0) target = $region9
  $region8: #{basic_block_forward.1} parent=0 // pred_region
    _
  $region9: #{basic_block_forward.1} parent=0 // pred_fallthru
    _
  // Predicated region
  $region10: #{basic_block_forward.1} parent=0 // pred_check
    _
  $region11: #{basic_block_forward.1} parent=0 // pred_check_branch
    %17 = sbr.rel (0) target = $region13
  $region12: #{basic_block_forward.1} parent=0 // pred_region
    _
  $region13: #{basic_block_forward.1} parent=0 // pred_fallthru
    _
  // Predicated region
  $region14: #{basic_block_forward.1} parent=0 // pred_check
    _
  $region15: #{basic_block_forward.1} parent=0 // pred_check_branch
    %19 = sbr.rel (0) target = $region17
  $region16: #{basic_block_forward.1} parent=0 // pred_region
    _
  $region17: #{basic_block_forward.1} parent=0 // pred_fallthru
    _
  // Predicated region
  $region18: #{basic_block_forward.1} parent=0 // pred_check
    _
  $region19: #{basic_block_forward.1} parent=0 // pred_check_branch
    %21 = sbr.rel (0) target = $region21
  $region20: #{basic_block_forward.1} parent=0 // pred_region
    _
  $region21: #{basic_block_forward.1} parent=0 // pred_fallthru
    _
  // Predicated region
  $region22: #{basic_block_forward.1} parent=0 // pred_check
    _
  $region23: #{basic_block_forward.1} parent=0 // pred_check_branch
    %23 = sbr.rel (0) target = $region25
  $region24: #{basic_block_forward.1} parent=0 // pred_region
    _
  $region25: #{basic_block_forward.1} parent=0 // pred_fallthru
    _
  // Predicated region
  $region26: #{basic_block_forward.1} parent=0 // pred_check
    _
  $region27: #{basic_block_forward.1} parent=0 // pred_check_branch
    %25 = sbr.rel (0) target = $region29
  $region28: #{basic_block_forward.1} parent=0 // pred_region
    _
  $region29: #{basic_block_forward.1} parent=0 // pred_fallthru
    _
  %v26 = vld [vmem:[%s1] sm:$0xf]
  %v27 = vld [vmem:[%s1 + $0x4] sm:$0xf]
  %v28 = vld [vmem:[%s1 + $0x8] sm:$0xf]
  %v29 = vld [vmem:[%s1 + $0xc] sm:$0xf]
  %v30 = vld [vmem:[%s1 + $0x10] sm:$0xf]
  %v31 = vld [vmem:[%s1 + $0x14] sm:$0xf]
  %v32 = vld [vmem:[%s1 + $0x18] sm:$0xf]
  %v33 = vld [vmem:[%s1 + $0x1c] sm:$0xf]
  %v34 = vld [vmem:[%s1 + $0x20] sm:$0xf]
  %v35 = vld [vmem:[%s2] sm:$0xf]
  %v36 = vld [vmem:[%s2 + $0x4] sm:$0xf]
  %v37 = vld [vmem:[%s2 + $0x8] sm:$0xf]
  %v38 = vld [vmem:[%s2 + $0xc] sm:$0xf]
  %v39 = vld [vmem:[%s2 + $0x10] sm:$0xf]
  %v40 = vld [vmem:[%s2 + $0x14] sm:$0xf]
  %v41 = vld [vmem:[%s2 + $0x18] sm:$0xf]
  %v42 = vld [vmem:[%s2 + $0x1c] sm:$0xf]
  %v43 = vld [vmem:[%s2 + $0x20] sm:$0xf]
  %vm44 = vcmask 31744
  %45 = vst.msk [vmem:[#allocation2] sm:$0xff] %vm44, 0.0
  %46 = vst.msk [vmem:[#allocation2 + $0x8] sm:$0xff] %vm44, 0.0
  %vm47 = vcmask 25600
  %48 = vst.msk [vmem:[#allocation2 + $0x10] sm:$0x3] %vm47, 0.0
  %49 = vst.msk [vmem:[#allocation2 + $0x1b0] sm:$0xff] %vm44, 0.0
  %50 = vst.msk [vmem:[#allocation2 + $0x1b8] sm:$0xff] %vm44, 0.0
  %51 = vst.msk [vmem:[#allocation2 + $0x1c0] sm:$0x3] %vm47, 0.0
  %s52 = scalar_lea.vmem [#allocation2], 408
  %53 = vst.msk [vmem:[%s52] sm:$0xff] %vm44, 0.0
  %54 = vst.msk [vmem:[%s52 + $0x8] sm:$0xff] %vm44, 0.0
  %55 = vst.msk [vmem:[%s52 + $0x10] sm:$0x3] %vm47, 0.0
  %56 = vst.msk [vmem:[%s52 + $0x1b0] sm:$0xff] %vm44, 0.0
  %57 = vst.msk [vmem:[%s52 + $0x1b8] sm:$0xff] %vm44, 0.0
  %58 = vst.msk [vmem:[%s52 + $0x1c0] sm:$0x3] %vm47, 0.0
  %vm59 = vcmask 24576
  %60 = vst.msk [vmem:[#allocation2] sm:$0x1] %vm59, 0.0
  %61 = vst.msk [vmem:[#allocation2 + $0x18] sm:$0x1] %vm59, 0.0
  %62 = vst.msk [vmem:[#allocation2 + $0x30] sm:$0x1] %vm59, 0.0
  %63 = vst.msk [vmem:[#allocation2 + $0x48] sm:$0x1] %vm59, 0.0
  %64 = vst.msk [vmem:[#allocation2 + $0x60] sm:$0x1] %vm59, 0.0
  %65 = vst.msk [vmem:[#allocation2 + $0x78] sm:$0x1] %vm59, 0.0
  %66 = vst.msk [vmem:[#allocation2 + $0x90] sm:$0x1] %vm59, 0.0
  %67 = vst.msk [vmem:[#allocation2 + $0xa8] sm:$0x1] %vm59, 0.0
  %68 = vst.msk [vmem:[#allocation2 + $0xc0] sm:$0x1] %vm59, 0.0
  %69 = vst.msk [vmem:[#allocation2 + $0xd8] sm:$0x1] %vm59, 0.0
  %70 = vst.msk [vmem:[#allocation2 + $0xf0] sm:$0x1] %vm59, 0.0
  %71 = vst.msk [vmem:[#allocation2 + $0x108] sm:$0x1] %vm59, 0.0
  %72 = vst.msk [vmem:[#allocation2 + $0x120] sm:$0x1] %vm59, 0.0
  %73 = vst.msk [vmem:[#allocation2 + $0x138] sm:$0x1] %vm59, 0.0
  %74 = vst.msk [vmem:[#allocation2 + $0x150] sm:$0x1] %vm59, 0.0
  %75 = vst.msk [vmem:[#allocation2 + $0x168] sm:$0x1] %vm59, 0.0
  %76 = vst.msk [vmem:[#allocation2 + $0x180] sm:$0x1] %vm59, 0.0
  %77 = vst.msk [vmem:[#allocation2 + $0x198] sm:$0x1] %vm59, 0.0
  %78 = vst.msk [vmem:[#allocation2 + $0x1b0] sm:$0x1] %vm59, 0.0
  %79 = vst.msk [vmem:[#allocation2 + $0x1c8] sm:$0x1] %vm59, 0.0
  %80 = vst.msk [vmem:[#allocation2 + $0x1e0] sm:$0x1] %vm59, 0.0
  %81 = vst.msk [vmem:[#allocation2 + $0x1f8] sm:$0x1] %vm59, 0.0
  %82 = vst.msk [vmem:[#allocation2 + $0x210] sm:$0x1] %vm59, 0.0
  %83 = vst.msk [vmem:[#allocation2 + $0x228] sm:$0x1] %vm59, 0.0
  %84 = vst.msk [vmem:[#allocation2 + $0x240] sm:$0x1] %vm59, 0.0
  %85 = vst.msk [vmem:[#allocation2 + $0x258] sm:$0x1] %vm59, 0.0
  %86 = vst.msk [vmem:[#allocation2 + $0x270] sm:$0x1] %vm59, 0.0
  %87 = vst.msk [vmem:[#allocation2 + $0x288] sm:$0x1] %vm59, 0.0
  %88 = vst.msk [vmem:[#allocation2 + $0x2a0] sm:$0x1] %vm59, 0.0
  %89 = vst.msk [vmem:[#allocation2 + $0x2b8] sm:$0x1] %vm59, 0.0
  %90 = vst.msk [vmem:[#allocation2 + $0x2d0] sm:$0x1] %vm59, 0.0
  %91 = vst.msk [vmem:[#allocation2 + $0x2e8] sm:$0x1] %vm59, 0.0
  %92 = vst.msk [vmem:[#allocation2 + $0x300] sm:$0x1] %vm59, 0.0
  %93 = vst.msk [vmem:[#allocation2 + $0x318] sm:$0x1] %vm59, 0.0
  %94 = vst.msk [vmem:[#allocation2 + $0x330] sm:$0x1] %vm59, 0.0
  %95 = vst.msk [vmem:[#allocation2 + $0x348] sm:$0x1] %vm59, 0.0
  %96 = vst.msk [vmem:[#allocation2 + $0x11] sm:$0x1] %vm59, 0.0
  %97 = vst.msk [vmem:[#allocation2 + $0x29] sm:$0x1] %vm59, 0.0
  %98 = vst.msk [vmem:[#allocation2 + $0x41] sm:$0x1] %vm59, 0.0
  %99 = vst.msk [vmem:[#allocation2 + $0x59] sm:$0x1] %vm59, 0.0
  %100 = vst.msk [vmem:[#allocation2 + $0x71] sm:$0x1] %vm59, 0.0
  %101 = vst.msk [vmem:[#allocation2 + $0x89] sm:$0x1] %vm59, 0.0
  %102 = vst.msk [vmem:[#allocation2 + $0xa1] sm:$0x1] %vm59, 0.0
  %103 = vst.msk [vmem:[#allocation2 + $0xb9] sm:$0x1] %vm59, 0.0
  %104 = vst.msk [vmem:[#allocation2 + $0xd1] sm:$0x1] %vm59, 0.0
  %105 = vst.msk [vmem:[#allocation2 + $0xe9] sm:$0x1] %vm59, 0.0
  %106 = vst.msk [vmem:[#allocation2 + $0x101] sm:$0x1] %vm59, 0.0
  %107 = vst.msk [vmem:[#allocation2 + $0x119] sm:$0x1] %vm59, 0.0
  %108 = vst.msk [vmem:[#allocation2 + $0x131] sm:$0x1] %vm59, 0.0
  %109 = vst.msk [vmem:[#allocation2 + $0x149] sm:$0x1] %vm59, 0.0
  %110 = vst.msk [vmem:[#allocation2 + $0x161] sm:$0x1] %vm59, 0.0
  %111 = vst.msk [vmem:[#allocation2 + $0x179] sm:$0x1] %vm59, 0.0
  %112 = vst.msk [vmem:[#allocation2 + $0x191] sm:$0x1] %vm59, 0.0
  %113 = vst.msk [vmem:[#allocation2 + $0x1a9] sm:$0x1] %vm59, 0.0
  %114 = vst.msk [vmem:[#allocation2 + $0x1c1] sm:$0x1] %vm59, 0.0
  %115 = vst.msk [vmem:[#allocation2 + $0x1d9] sm:$0x1] %vm59, 0.0
  %116 = vst.msk [vmem:[#allocation2 + $0x1f1] sm:$0x1] %vm59, 0.0
  %117 = vst.msk [vmem:[#allocation2 + $0x209] sm:$0x1] %vm59, 0.0
  %118 = vst.msk [vmem:[#allocation2 + $0x221] sm:$0x1] %vm59, 0.0
  %119 = vst.msk [vmem:[#allocation2 + $0x239] sm:$0x1] %vm59, 0.0
  %120 = vst.msk [vmem:[#allocation2 + $0x251] sm:$0x1] %vm59, 0.0
  %121 = vst.msk [vmem:[#allocation2 + $0x269] sm:$0x1] %vm59, 0.0
  %122 = vst.msk [vmem:[#allocation2 + $0x281] sm:$0x1] %vm59, 0.0
  %123 = vst.msk [vmem:[#allocation2 + $0x299] sm:$0x1] %vm59, 0.0
  %124 = vst.msk [vmem:[#allocation2 + $0x2b1] sm:$0x1] %vm59, 0.0
  %125 = vst.msk [vmem:[#allocation2 + $0x2c9] sm:$0x1] %vm59, 0.0
  %126 = vst.msk [vmem:[#allocation2 + $0x2e1] sm:$0x1] %vm59, 0.0
  %127 = vst.msk [vmem:[#allocation2 + $0x2f9] sm:$0x1] %vm59, 0.0
  %128 = vst.msk [vmem:[#allocation2 + $0x311] sm:$0x1] %vm59, 0.0
  %129 = vst.msk [vmem:[#allocation2 + $0x329] sm:$0x1] %vm59, 0.0
  %130 = vst.msk [vmem:[#allocation2 + $0x341] sm:$0x1] %vm59, 0.0
  %131 = vst.msk [vmem:[#allocation2 + $0x359] sm:$0x1] %vm59, 0.0
  %v132 = vld [vmem:[%s0] sm:$0xff]
  %v133 = vld [vmem:[%s0 + $0x8] sm:$0xff]
  %v134 = vld [vmem:[%s0 + $0x10] sm:$0xff]
  %v135 = vld [vmem:[%s0 + $0x18] sm:$0xff]
  %v136 = vld [vmem:[%s0 + $0x20] sm:$0xff]
  %v137 = vld [vmem:[%s0 + $0x28] sm:$0xff]
  %v138 = vld [vmem:[%s0 + $0x30] sm:$0xff]
  %v139 = vld [vmem:[%s0 + $0x38] sm:$0xff]
  %v140 = vld [vmem:[%s0 + $0x40] sm:$0xff]
  %v141 = vld [vmem:[%s0 + $0x48] sm:$0xff]
  %v142 = vld [vmem:[%s0 + $0x50] sm:$0xff]
  %v143 = vld [vmem:[%s0 + $0x58] sm:$0xff]
  %v144 = vld [vmem:[%s0 + $0x60] sm:$0xff]
  %v145 = vld [vmem:[%s0 + $0x68] sm:$0xff]
  %v146 = vld [vmem:[%s0 + $0x70] sm:$0xff]
  %v147 = vld [vmem:[%s0 + $0x78] sm:$0xff]
  %v148 = vld [vmem:[%s0 + $0x80] sm:$0xff]
  %v149 = vld [vmem:[%s0 + $0x88] sm:$0xff]
  %v150 = vld [vmem:[%s0 + $0x90] sm:$0xff]
  %v151 = vld [vmem:[%s0 + $0x98] sm:$0xff]
  %v152 = vld [vmem:[%s0 + $0xa0] sm:$0xff]
  %v153 = vld [vmem:[%s0 + $0xa8] sm:$0xff]
  %v154 = vld [vmem:[%s0 + $0xb0] sm:$0xff]
  %v155 = vld [vmem:[%s0 + $0xb8] sm:$0xff]
  %v156 = vld [vmem:[%s0 + $0xc0] sm:$0xff]
  %v157 = vld [vmem:[%s0 + $0xc8] sm:$0xff]
  %v158 = vld [vmem:[%s0 + $0xd0] sm:$0xff]
  %v159 = vld [vmem:[%s0 + $0xd8] sm:$0xff]
  %v160 = vld [vmem:[%s0 + $0xe0] sm:$0xff]
  %v161 = vld [vmem:[%s0 + $0xe8] sm:$0xff]
  %v162 = vld [vmem:[%s0 + $0xf0] sm:$0xff]
  %v163 = vld [vmem:[%s0 + $0xf8] sm:$0xff]
  %v164 = vld [vmem:[%s0 + $0x100] sm:$0xff]
  %v165 = vld [vmem:[%s0 + $0x108] sm:$0xff]
  %v166 = vld [vmem:[%s0 + $0x110] sm:$0xff]
  %v167 = vld [vmem:[%s0 + $0x118] sm:$0xff]
  %v168 = vld [vmem:[%s0 + $0x120] sm:$0xff]
  %v169 = vld [vmem:[%s0 + $0x128] sm:$0xff]
  %v170 = vld [vmem:[%s0 + $0x130] sm:$0xff]
  %v171 = vld [vmem:[%s0 + $0x138] sm:$0xff]
  %v172 = vld [vmem:[%s0 + $0x140] sm:$0xff]
  %v173 = vld [vmem:[%s0 + $0x148] sm:$0xff]
  %v174 = vld [vmem:[%s0 + $0x150] sm:$0xff]
  %v175 = vld [vmem:[%s0 + $0x158] sm:$0xff]
  %v176 = vld [vmem:[%s0 + $0x160] sm:$0xff]
  %v177 = vld [vmem:[%s0 + $0x168] sm:$0xff]
  %v178 = vld [vmem:[%s0 + $0x170] sm:$0xff]
  %v179 = vld [vmem:[%s0 + $0x178] sm:$0xff]
  %v180 = vld [vmem:[%s0 + $0x180] sm:$0xff]
  %v181 = vld [vmem:[%s0 + $0x188] sm:$0xff]
  %v182 = vld [vmem:[%s0 + $0x190] sm:$0xff]
  %v183 = vld [vmem:[%s0 + $0x198] sm:$0xff]
  %v184 = vld [vmem:[%s0 + $0x1a0] sm:$0xff]
  %v185 = vld [vmem:[%s0 + $0x1a8] sm:$0xff]
  %v186 = vld [vmem:[%s0 + $0x1b0] sm:$0xff]
  %v187 = vld [vmem:[%s0 + $0x1b8] sm:$0xff]
  %v188 = vld [vmem:[%s0 + $0x1c0] sm:$0xff]
  %v189 = vld [vmem:[%s0 + $0x1c8] sm:$0xff]
  %v190 = vld [vmem:[%s0 + $0x1d0] sm:$0xff]
  %v191 = vld [vmem:[%s0 + $0x1d8] sm:$0xff]
  %v192 = vld [vmem:[%s0 + $0x1e0] sm:$0xff]
  %v193 = vld [vmem:[%s0 + $0x1e8] sm:$0xff]
  %v194 = vld [vmem:[%s0 + $0x1f0] sm:$0xff]
  %v195 = vld [vmem:[%s0 + $0x1f8] sm:$0xff]
  %s196 = scalar_lea.vmem [#allocation2], 24
  %197 = vst.msk [vmem:[%s196 + $0x1] sm:$0xff] %vm44, %v132
  %198 = vst.msk [vmem:[%s196 + $0x9] sm:$0xff] %vm44, %v133
  %199 = vst.msk [vmem:[%s196 + $0x19] sm:$0xff] %vm44, %v134
  %200 = vst.msk [vmem:[%s196 + $0x21] sm:$0xff] %vm44, %v135
  %201 = vst.msk [vmem:[%s196 + $0x31] sm:$0xff] %vm44, %v136
  %202 = vst.msk [vmem:[%s196 + $0x39] sm:$0xff] %vm44, %v137
  %203 = vst.msk [vmem:[%s196 + $0x49] sm:$0xff] %vm44, %v138
  %204 = vst.msk [vmem:[%s196 + $0x51] sm:$0xff] %vm44, %v139
  %205 = vst.msk [vmem:[%s196 + $0x61] sm:$0xff] %vm44, %v140
  %206 = vst.msk [vmem:[%s196 + $0x69] sm:$0xff] %vm44, %v141
  %207 = vst.msk [vmem:[%s196 + $0x79] sm:$0xff] %vm44, %v142
  %208 = vst.msk [vmem:[%s196 + $0x81] sm:$0xff] %vm44, %v143
  %209 = vst.msk [vmem:[%s196 + $0x91] sm:$0xff] %vm44, %v144
  %210 = vst.msk [vmem:[%s196 + $0x99] sm:$0xff] %vm44, %v145
  %211 = vst.msk [vmem:[%s196 + $0xa9] sm:$0xff] %vm44, %v146
  %212 = vst.msk [vmem:[%s196 + $0xb1] sm:$0xff] %vm44, %v147
  %213 = vst.msk [vmem:[%s196 + $0xc1] sm:$0xff] %vm44, %v148
  %214 = vst.msk [vmem:[%s196 + $0xc9] sm:$0xff] %vm44, %v149
  %215 = vst.msk [vmem:[%s196 + $0xd9] sm:$0xff] %vm44, %v150
  %216 = vst.msk [vmem:[%s196 + $0xe1] sm:$0xff] %vm44, %v151
  %217 = vst.msk [vmem:[%s196 + $0xf1] sm:$0xff] %vm44, %v152
  %218 = vst.msk [vmem:[%s196 + $0xf9] sm:$0xff] %vm44, %v153
  %219 = vst.msk [vmem:[%s196 + $0x109] sm:$0xff] %vm44, %v154
  %220 = vst.msk [vmem:[%s196 + $0x111] sm:$0xff] %vm44, %v155
  %221 = vst.msk [vmem:[%s196 + $0x121] sm:$0xff] %vm44, %v156
  %222 = vst.msk [vmem:[%s196 + $0x129] sm:$0xff] %vm44, %v157
  %223 = vst.msk [vmem:[%s196 + $0x139] sm:$0xff] %vm44, %v158
  %224 = vst.msk [vmem:[%s196 + $0x141] sm:$0xff] %vm44, %v159
  %225 = vst.msk [vmem:[%s196 + $0x151] sm:$0xff] %vm44, %v160
  %226 = vst.msk [vmem:[%s196 + $0x159] sm:$0xff] %vm44, %v161
  %227 = vst.msk [vmem:[%s196 + $0x169] sm:$0xff] %vm44, %v162
  %228 = vst.msk [vmem:[%s196 + $0x171] sm:$0xff] %vm44, %v163
  %229 = vst.msk [vmem:[%s196 + $0x1b1] sm:$0xff] %vm44, %v164
  %230 = vst.msk [vmem:[%s196 + $0x1b9] sm:$0xff] %vm44, %v165
  %231 = vst.msk [vmem:[%s196 + $0x1c9] sm:$0xff] %vm44, %v166
  %232 = vst.msk [vmem:[%s196 + $0x1d1] sm:$0xff] %vm44, %v167
  %233 = vst.msk [vmem:[%s196 + $0x1e1] sm:$0xff] %vm44, %v168
  %234 = vst.msk [vmem:[%s196 + $0x1e9] sm:$0xff] %vm44, %v169
  %235 = vst.msk [vmem:[%s196 + $0x1f9] sm:$0xff] %vm44, %v170
  %236 = vst.msk [vmem:[%s196 + $0x201] sm:$0xff] %vm44, %v171
  %237 = vst.msk [vmem:[%s196 + $0x211] sm:$0xff] %vm44, %v172
  %238 = vst.msk [vmem:[%s196 + $0x219] sm:$0xff] %vm44, %v173
  %239 = vst.msk [vmem:[%s196 + $0x229] sm:$0xff] %vm44, %v174
  %240 = vst.msk [vmem:[%s196 + $0x231] sm:$0xff] %vm44, %v175
  %241 = vst.msk [vmem:[%s196 + $0x241] sm:$0xff] %vm44, %v176
  %242 = vst.msk [vmem:[%s196 + $0x249] sm:$0xff] %vm44, %v177
  %243 = vst.msk [vmem:[%s196 + $0x259] sm:$0xff] %vm44, %v178
  %244 = vst.msk [vmem:[%s196 + $0x261] sm:$0xff] %vm44, %v179
  %245 = vst.msk [vmem:[%s196 + $0x271] sm:$0xff] %vm44, %v180
  %246 = vst.msk [vmem:[%s196 + $0x279] sm:$0xff] %vm44, %v181
  %247 = vst.msk [vmem:[%s196 + $0x289] sm:$0xff] %vm44, %v182
  %248 = vst.msk [vmem:[%s196 + $0x291] sm:$0xff] %vm44, %v183
  %249 = vst.msk [vmem:[%s196 + $0x2a1] sm:$0xff] %vm44, %v184
  %250 = vst.msk [vmem:[%s196 + $0x2a9] sm:$0xff] %vm44, %v185
  %251 = vst.msk [vmem:[%s196 + $0x2b9] sm:$0xff] %vm44, %v186
  %252 = vst.msk [vmem:[%s196 + $0x2c1] sm:$0xff] %vm44, %v187
  %253 = vst.msk [vmem:[%s196 + $0x2d1] sm:$0xff] %vm44, %v188
  %254 = vst.msk [vmem:[%s196 + $0x2d9] sm:$0xff] %vm44, %v189
  %255 = vst.msk [vmem:[%s196 + $0x2e9] sm:$0xff] %vm44, %v190
  %256 = vst.msk [vmem:[%s196 + $0x2f1] sm:$0xff] %vm44, %v191
  %257 = vst.msk [vmem:[%s196 + $0x301] sm:$0xff] %vm44, %v192
  %258 = vst.msk [vmem:[%s196 + $0x309] sm:$0xff] %vm44, %v193
  %259 = vst.msk [vmem:[%s196 + $0x319] sm:$0xff] %vm44, %v194
  %260 = vst.msk [vmem:[%s196 + $0x321] sm:$0xff] %vm44, %v195
  %v261 = vld [vmem:[#allocation2] sm:$0xff]
  %v262 = vld [vmem:[#allocation2 + $0x8] sm:$0xff]
  %v263 = vld [vmem:[#allocation2 + $0x18] sm:$0xff]
  %v264 = vld [vmem:[#allocation2 + $0x20] sm:$0xff]
  %v265 = vld [vmem:[#allocation2 + $0x30] sm:$0xff]
  %v266 = vld [vmem:[#allocation2 + $0x38] sm:$0xff]
  %v267 = vld [vmem:[#allocation2 + $0x48] sm:$0xff]
  %v268 = vld [vmem:[#allocation2 + $0x50] sm:$0xff]
  %v269 = vld [vmem:[#allocation2 + $0x60] sm:$0xff]
  %v270 = vld [vmem:[#allocation2 + $0x68] sm:$0xff]
  %v271 = vld [vmem:[#allocation2 + $0x78] sm:$0xff]
  %v272 = vld [vmem:[#allocation2 + $0x80] sm:$0xff]
  %v273 = vld [vmem:[#allocation2 + $0x90] sm:$0xff]
  %v274 = vld [vmem:[#allocation2 + $0x98] sm:$0xff]
  %v275 = vld [vmem:[#allocation2 + $0xa8] sm:$0xff]
  %v276 = vld [vmem:[#allocation2 + $0xb0] sm:$0xff]
  %v277 = vld [vmem:[#allocation2 + $0xc0] sm:$0xff]
  %v278 = vld [vmem:[#allocation2 + $0xc8] sm:$0xff]
  %v279 = vld [vmem:[#allocation2 + $0xd8] sm:$0xff]
  %v280 = vld [vmem:[#allocation2 + $0xe0] sm:$0xff]
  %v281 = vld [vmem:[#allocation2 + $0xf0] sm:$0xff]
  %v282 = vld [vmem:[#allocation2 + $0xf8] sm:$0xff]
  %v283 = vld [vmem:[#allocation2 + $0x108] sm:$0xff]
  %v284 = vld [vmem:[#allocation2 + $0x110] sm:$0xff]
  %v285 = vld [vmem:[#allocation2 + $0x120] sm:$0xff]
  %v286 = vld [vmem:[#allocation2 + $0x128] sm:$0xff]
  %v287 = vld [vmem:[#allocation2 + $0x138] sm:$0xff]
  %v288 = vld [vmem:[#allocation2 + $0x140] sm:$0xff]
  %v289 = vld [vmem:[#allocation2 + $0x150] sm:$0xff]
  %v290 = vld [vmem:[#allocation2 + $0x158] sm:$0xff]
  %v291 = vld [vmem:[#allocation2 + $0x168] sm:$0xff]
  %v292 = vld [vmem:[#allocation2 + $0x170] sm:$0xff]
  %v293 = vld [vmem:[#allocation2 + $0x1b0] sm:$0xff]
  %v294 = vld [vmem:[#allocation2 + $0x1b8] sm:$0xff]
  %v295 = vld [vmem:[#allocation2 + $0x1c8] sm:$0xff]
  %v296 = vld [vmem:[#allocation2 + $0x1d0] sm:$0xff]
  %v297 = vld [vmem:[#allocation2 + $0x1e0] sm:$0xff]
  %v298 = vld [vmem:[#allocation2 + $0x1e8] sm:$0xff]
  %v299 = vld [vmem:[#allocation2 + $0x1f8] sm:$0xff]
  %v300 = vld [vmem:[#allocation2 + $0x200] sm:$0xff]
  %v301 = vld [vmem:[#allocation2 + $0x210] sm:$0xff]
  %v302 = vld [vmem:[#allocation2 + $0x218] sm:$0xff]
  %v303 = vld [vmem:[#allocation2 + $0x228] sm:$0xff]
  %v304 = vld [vmem:[#allocation2 + $0x230] sm:$0xff]
  %v305 = vld [vmem:[#allocation2 + $0x240] sm:$0xff]
  %v306 = vld [vmem:[#allocation2 + $0x248] sm:$0xff]
  %v307 = vld [vmem:[#allocation2 + $0x258] sm:$0xff]
  %v308 = vld [vmem:[#allocation2 + $0x260] sm:$0xff]
  %v309 = vld [vmem:[#allocation2 + $0x270] sm:$0xff]
  %v310 = vld [vmem:[#allocation2 + $0x278] sm:$0xff]
  %v311 = vld [vmem:[#allocation2 + $0x288] sm:$0xff]
  %v312 = vld [vmem:[#allocation2 + $0x290] sm:$0xff]
  %v313 = vld [vmem:[#allocation2 + $0x2a0] sm:$0xff]
  %v314 = vld [vmem:[#allocation2 + $0x2a8] sm:$0xff]
  %v315 = vld [vmem:[#allocation2 + $0x2b8] sm:$0xff]
  %v316 = vld [vmem:[#allocation2 + $0x2c0] sm:$0xff]
  %v317 = vld [vmem:[#allocation2 + $0x2d0] sm:$0xff]
  %v318 = vld [vmem:[#allocation2 + $0x2d8] sm:$0xff]
  %v319 = vld [vmem:[#allocation2 + $0x2e8] sm:$0xff]
  %v320 = vld [vmem:[#allocation2 + $0x2f0] sm:$0xff]
  %v321 = vld [vmem:[#allocation2 + $0x300] sm:$0xff]
  %v322 = vld [vmem:[#allocation2 + $0x308] sm:$0xff]
  %v323 = vld [vmem:[#allocation2 + $0x318] sm:$0xff]
  %v324 = vld [vmem:[#allocation2 + $0x320] sm:$0xff]
  %v325 = vld [vmem:[#allocation2 + $0x1] sm:$0xff]
  %v326 = vld [vmem:[#allocation2 + $0x9] sm:$0xff]
  %v327 = vld [vmem:[#allocation2 + $0x19] sm:$0xff]
  %v328 = vld [vmem:[#allocation2 + $0x21] sm:$0xff]
  %v329 = vld [vmem:[#allocation2 + $0x31] sm:$0xff]
  %v330 = vld [vmem:[#allocation2 + $0x39] sm:$0xff]
  %v331 = vld [vmem:[#allocation2 + $0x49] sm:$0xff]
  %v332 = vld [vmem:[#allocation2 + $0x51] sm:$0xff]
  %v333 = vld [vmem:[#allocation2 + $0x61] sm:$0xff]
  %v334 = vld [vmem:[#allocation2 + $0x69] sm:$0xff]
  %v335 = vld [vmem:[#allocation2 + $0x79] sm:$0xff]
  %v336 = vld [vmem:[#allocation2 + $0x81] sm:$0xff]
  %v337 = vld [vmem:[#allocation2 + $0x91] sm:$0xff]
  %v338 = vld [vmem:[#allocation2 + $0x99] sm:$0xff]
  %v339 = vld [vmem:[#allocation2 + $0xa9] sm:$0xff]
  %v340 = vld [vmem:[#allocation2 + $0xb1] sm:$0xff]
  %v341 = vld [vmem:[#allocation2 + $0xc1] sm:$0xff]
  %v342 = vld [vmem:[#allocation2 + $0xc9] sm:$0xff]
  %v343 = vld [vmem:[#allocation2 + $0xd9] sm:$0xff]
  %v344 = vld [vmem:[#allocation2 + $0xe1] sm:$0xff]
  %v345 = vld [vmem:[#allocation2 + $0xf1] sm:$0xff]
  %v346 = vld [vmem:[#allocation2 + $0xf9] sm:$0xff]
  %v347 = vld [vmem:[#allocation2 + $0x109] sm:$0xff]
  %v348 = vld [vmem:[#allocation2 + $0x111] sm:$0xff]
  %v349 = vld [vmem:[#allocation2 + $0x121] sm:$0xff]
  %v350 = vld [vmem:[#allocation2 + $0x129] sm:$0xff]
  %v351 = vld [vmem:[#allocation2 + $0x139] sm:$0xff]
  %v352 = vld [vmem:[#allocation2 + $0x141] sm:$0xff]
  %v353 = vld [vmem:[#allocation2 + $0x151] sm:$0xff]
  %v354 = vld [vmem:[#allocation2 + $0x159] sm:$0xff]
  %v355 = vld [vmem:[#allocation2 + $0x169] sm:$0xff]
  %v356 = vld [vmem:[#allocation2 + $0x171] sm:$0xff]
  %v357 = vld [vmem:[#allocation2 + $0x1b1] sm:$0xff]
  %v358 = vld [vmem:[#allocation2 + $0x1b9] sm:$0xff]
  %v359 = vld [vmem:[#allocation2 + $0x1c9] sm:$0xff]
  %v360 = vld [vmem:[#allocation2 + $0x1d1] sm:$0xff]
  %v361 = vld [vmem:[#allocation2 + $0x1e1] sm:$0xff]
  %v362 = vld [vmem:[#allocation2 + $0x1e9] sm:$0xff]
  %v363 = vld [vmem:[#allocation2 + $0x1f9] sm:$0xff]
  %v364 = vld [vmem:[#allocation2 + $0x201] sm:$0xff]
  %v365 = vld [vmem:[#allocation2 + $0x211] sm:$0xff]
  %v366 = vld [vmem:[#allocation2 + $0x219] sm:$0xff]
  %v367 = vld [vmem:[#allocation2 + $0x229] sm:$0xff]
  %v368 = vld [vmem:[#allocation2 + $0x231] sm:$0xff]
  %v369 = vld [vmem:[#allocation2 + $0x241] sm:$0xff]
  %v370 = vld [vmem:[#allocation2 + $0x249] sm:$0xff]
  %v371 = vld [vmem:[#allocation2 + $0x259] sm:$0xff]
  %v372 = vld [vmem:[#allocation2 + $0x261] sm:$0xff]
  %v373 = vld [vmem:[#allocation2 + $0x271] sm:$0xff]
  %v374 = vld [vmem:[#allocation2 + $0x279] sm:$0xff]
  %v375 = vld [vmem:[#allocation2 + $0x289] sm:$0xff]
  %v376 = vld [vmem:[#allocation2 + $0x291] sm:$0xff]
  %v377 = vld [vmem:[#allocation2 + $0x2a1] sm:$0xff]
  %v378 = vld [vmem:[#allocation2 + $0x2a9] sm:$0xff]
  %v379 = vld [vmem:[#allocation2 + $0x2b9] sm:$0xff]
  %v380 = vld [vmem:[#allocation2 + $0x2c1] sm:$0xff]
  %v381 = vld [vmem:[#allocation2 + $0x2d1] sm:$0xff]
  %v382 = vld [vmem:[#allocation2 + $0x2d9] sm:$0xff]
  %v383 = vld [vmem:[#allocation2 + $0x2e9] sm:$0xff]
  %v384 = vld [vmem:[#allocation2 + $0x2f1] sm:$0xff]
  %v385 = vld [vmem:[#allocation2 + $0x301] sm:$0xff]
  %v386 = vld [vmem:[#allocation2 + $0x309] sm:$0xff]
  %v387 = vld [vmem:[#allocation2 + $0x319] sm:$0xff]
  %v388 = vld [vmem:[#allocation2 + $0x321] sm:$0xff]
  %v390 = vsel %vm44, %v325, 0
  %v393 = vsel %vm44, %v326, 0
  %v396 = vsel %vm44, %v327, 0
  %v399 = vsel %vm44, %v328, 0
  %v402 = vsel %vm44, %v329, 0
  %v405 = vsel %vm44, %v330, 0
  %v408 = vsel %vm44, %v331, 0
  %v411 = vsel %vm44, %v332, 0
  %v414 = vsel %vm44, %v333, 0
  %v417 = vsel %vm44, %v334, 0
  %v420 = vsel %vm44, %v335, 0
  %v423 = vsel %vm44, %v336, 0
  %v426 = vsel %vm44, %v337, 0
  %v429 = vsel %vm44, %v338, 0
  %v432 = vsel %vm44, %v339, 0
  %v435 = vsel %vm44, %v340, 0
  %v438 = vsel %vm44, %v341, 0
  %v441 = vsel %vm44, %v342, 0
  %v444 = vsel %vm44, %v343, 0
  %v447 = vsel %vm44, %v344, 0
  %v450 = vsel %vm44, %v345, 0
  %v453 = vsel %vm44, %v346, 0
  %v456 = vsel %vm44, %v347, 0
  %v459 = vsel %vm44, %v348, 0
  %v462 = vsel %vm44, %v349, 0
  %v465 = vsel %vm44, %v350, 0
  %v468 = vsel %vm44, %v351, 0
  %v471 = vsel %vm44, %v352, 0
  %v474 = vsel %vm44, %v353, 0
  %v477 = vsel %vm44, %v354, 0
  %v480 = vsel %vm44, %v355, 0
  %v483 = vsel %vm44, %v356, 0
  %v486 = vsel %vm44, %v357, 0
  %v489 = vsel %vm44, %v358, 0
  %v492 = vsel %vm44, %v359, 0
  %v495 = vsel %vm44, %v360, 0
  %v498 = vsel %vm44, %v361, 0
  %v501 = vsel %vm44, %v362, 0
  %v504 = vsel %vm44, %v363, 0
  %v507 = vsel %vm44, %v364, 0
  %v510 = vsel %vm44, %v365, 0
  %v513 = vsel %vm44, %v366, 0
  %v516 = vsel %vm44, %v367, 0
  %v519 = vsel %vm44, %v368, 0
  %v522 = vsel %vm44, %v369, 0
  %v525 = vsel %vm44, %v370, 0
  %v528 = vsel %vm44, %v371, 0
  %v531 = vsel %vm44, %v372, 0
  %v534 = vsel %vm44, %v373, 0
  %v537 = vsel %vm44, %v374, 0
  %v540 = vsel %vm44, %v375, 0
  %v543 = vsel %vm44, %v376, 0
  %v546 = vsel %vm44, %v377, 0
  %v549 = vsel %vm44, %v378, 0
  %v552 = vsel %vm44, %v379, 0
  %v555 = vsel %vm44, %v380, 0
  %v558 = vsel %vm44, %v381, 0
  %v561 = vsel %vm44, %v382, 0
  %v564 = vsel %vm44, %v383, 0
  %v567 = vsel %vm44, %v384, 0
  %v570 = vsel %vm44, %v385, 0
  %v573 = vsel %vm44, %v386, 0
  %v576 = vsel %vm44, %v387, 0
  %v579 = vsel %vm44, %v388, 0
  %vm581 = vcmask 1043456
  %v583 = vsel %vm581, %v27, 0
  %585 = vmatprep.subr.mxu0 0.0
  %586 = vmatpush1.msra.mxu0 %v583
  %587 = vmatprep.subr.mxu0 0.0
  %588 = vmatpush1.msra.mxu0 0.0
  %589 = vmatprep.subr.mxu0 0.0
  %590 = vmatpush1.msra.mxu0 0.0
  %591 = vmatprep.subr.mxu0 0.0
  %592 = vmatpush1.msra.mxu0 0.0
  %593 = vmatprep.subr.mxu0 0.0
  %594 = vmatpush1.msra.mxu0 0.0
  %595 = vmatprep.subr.mxu0 0.0
  %596 = vmatpush1.msra.mxu0 0.0
  %597 = vmatprep.subr.mxu0 0.0
  %598 = vmatpush1.msra.mxu0 0.0
  %599 = vmatprep.subr.mxu0 0.0
  %600 = vmatpush1.msra.mxu0 0.0
  %601 = vmatprep.subr.mxu0 0.0
  %602 = vmatpush1.msra.mxu0 0.0
  %603 = vmatprep.subr.mxu0 0.0
  %604 = vmatpush1.msra.mxu0 0.0
  %605 = vmatprep.subr.mxu0 0.0
  %606 = vmatpush1.msra.mxu0 0.0
  %607 = vmatprep.subr.mxu0 0.0
  %608 = vmatpush1.msra.mxu0 0.0
  %609 = vmatprep.subr.mxu0 0.0
  %610 = vmatpush1.msra.mxu0 0.0
  %611 = vmatprep.subr.mxu0 0.0
  %612 = vmatpush1.msra.mxu0 0.0
  %613 = vmatprep.subr.mxu0 0.0
  %614 = vmatpush1.msra.mxu0 0.0
  %615 = vmatprep.subr.mxu0 0.0
  %616 = vmatpush1.msra.mxu0 0.0
  %617 = vmatprep.subr.mxu0 0.0
  %618 = vmatpush1.msra.mxu0 0.0
  %619 = vmatprep.subr.mxu0 0.0
  %620 = vmatpush1.msra.mxu0 0.0
  %621 = vmatprep.subr.mxu0 0.0
  %622 = vmatpush1.msra.mxu0 0.0
  %623 = vmatprep.subr.mxu0 0.0
  %624 = vmatpush1.msra.mxu0 0.0
  %625 = vmatprep.subr.mxu0 0.0
  %626 = vmatpush1.msra.mxu0 0.0
  %627 = vmatprep.subr.mxu0 0.0
  %628 = vmatpush1.msra.mxu0 0.0
  %629 = vmatprep.subr.mxu0 0.0
  %630 = vmatpush1.msra.mxu0 0.0
  %631 = vmatprep.subr.mxu0 0.0
  %632 = vmatpush1.msra.mxu0 0.0
  %633 = vmatprep.subr.mxu0 0.0
  %634 = vmatpush1.msra.mxu0 0.0
  %635 = vmatprep.subr.mxu0 0.0
  %636 = vmatpush1.msra.mxu0 0.0
  %637 = vmatprep.subr.mxu0 0.0
  %638 = vmatpush1.msra.mxu0 0.0
  %639 = vmatprep.subr.mxu0 0.0
  %640 = vmatpush1.msra.mxu0 0.0
  %641 = vmatprep.subr.mxu0 0.0
  %642 = vmatpush1.msra.mxu0 0.0
  %643 = vmatprep.subr.mxu0 0.0
  %644 = vmatpush1.msra.mxu0 0.0
  %645 = vmatprep.subr.mxu0 0.0
  %646 = vmatpush1.msra.mxu0 0.0
  %647 = vmatprep.subr.mxu0 0.0
  %648 = vmatpush1.msra.mxu0 0.0
  %649 = vmatprep.mubr.f32.mxu0 0.0
  %650 = vmatmul.mubr.f32.gmra.mrb[0].mxu0 %v390
  %v651 = vpop.f32.mrb[0].mxu0
  %v652 = vadd.f32 0.0, %v651
  %v653 = vpop.f32.mrb[0].mxu0
  %654 = vmatprep.mubr.f32.mxu0 0.0
  %655 = vmatmul.mubr.f32.gmra.mrb[0].mxu0 %v393
  %v656 = vpop.f32.mrb[0].mxu0
  %v657 = vadd.f32 0.0, %v656
  %v658 = vpop.f32.mrb[0].mxu0
  %659 = vmatprep.mubr.f32.mxu0 0.0
  %660 = vmatmul.mubr.f32.gmra.mrb[0].mxu0 %v396
  %v661 = vpop.f32.mrb[0].mxu0
  %v662 = vadd.f32 0.0, %v661
  %v663 = vpop.f32.mrb[0].mxu0
  %664 = vmatprep.mubr.f32.mxu0 0.0
  %665 = vmatmul.mubr.f32.gmra.mrb[0].mxu0 %v399
  %v666 = vpop.f32.mrb[0].mxu0
  %v667 = vadd.f32 0.0, %v666
  %v668 = vpop.f32.mrb[0].mxu0
  %669 = vmatprep.mubr.f32.mxu0 0.0
  %670 = vmatmul.mubr.f32.gmra.mrb[0].mxu0 %v402
  %v671 = vpop.f32.mrb[0].mxu0
  %v672 = vadd.f32 0.0, %v671
  %v673 = vpop.f32.mrb[0].mxu0
  %674 = vmatprep.mubr.f32.mxu0 0.0
  %675 = vmatmul.mubr.f32.gmra.mrb[0].mxu0 %v405
  %v676 = vpop.f32.mrb[0].mxu0
  %v677 = vadd.f32 0.0, %v676
  %v678 = vpop.f32.mrb[0].mxu0
  %679 = vmatprep.mubr.f32.mxu0 0.0
  %680 = vmatmul.mubr.f32.gmra.mrb[0].mxu0 %v408
  %v681 = vpop.f32.mrb[0].mxu0
  %v682 = vadd.f32 0.0, %v681
  %v683 = vpop.f32.mrb[0].mxu0
  %684 = vmatprep.mubr.f32.mxu0 0.0
  %685 = vmatmul.mubr.f32.gmra.mrb[0].mxu0 %v411
  %v686 = vpop.f32.mrb[0].mxu0
  %v687 = vadd.f32 0.0, %v686
  %v688 = vpop.f32.mrb[0].mxu0
  %689 = vmatprep.mubr.f32.mxu0 0.0
  %690 = vmatmul.mubr.f32.gmra.mrb[0].mxu0 %v414
  %v691 = vpop.f32.mrb[0].mxu0
  %v692 = vadd.f32 0.0, %v691
  %v693 = vpop.f32.mrb[0].mxu0
  %694 = vmatprep.mubr.f32.mxu0 0.0
  %695 = vmatmul.mubr.f32.gmra.mrb[0].mxu0 %v417
  %v696 = vpop.f32.mrb[0].mxu0
  %v697 = vadd.f32 0.0, %v696
  %v698 = vpop.f32.mrb[0].mxu0
  %699 = vmatprep.mubr.f32.mxu0 0.0
  %700 = vmatmul.mubr.f32.gmra.mrb[0].mxu0 %v420
  %v701 = vpop.f32.mrb[0].mxu0
  %v702 = vadd.f32 0.0, %v701
  %v703 = vpop.f32.mrb[0].mxu0
  %704 = vmatprep.mubr.f32.mxu0 0.0
  %705 = vmatmul.mubr.f32.gmra.mrb[0].mxu0 %v423
  %v706 = vpop.f32.mrb[0].mxu0
  %v707 = vadd.f32 0.0, %v706
  %v708 = vpop.f32.mrb[0].mxu0
  %709 = vmatprep.mubr.f32.mxu0 0.0
  %710 = vmatmul.mubr.f32.gmra.mrb[0].mxu0 %v426
  %v711 = vpop.f32.mrb[0].mxu0
  %v712 = vadd.f32 0.0, %v711
  %v713 = vpop.f32.mrb[0].mxu0
  %714 = vmatprep.mubr.f32.mxu0 0.0
  %715 = vmatmul.mubr.f32.gmra.mrb[0].mxu0 %v429
  %v716 = vpop.f32.mrb[0].mxu0
  %v717 = vadd.f32 0.0, %v716
  %v718 = vpop.f32.mrb[0].mxu0
  %719 = vmatprep.mubr.f32.mxu0 0.0
  %720 = vmatmul.mubr.f32.gmra.mrb[0].mxu0 %v432
  %v721 = vpop.f32.mrb[0].mxu0
  %v722 = vadd.f32 0.0, %v721
  %v723 = vpop.f32.mrb[0].mxu0
  %724 = vmatprep.mubr.f32.mxu0 0.0
  %725 = vmatmul.mubr.f32.gmra.mrb[0].mxu0 %v435
  %v726 = vpop.f32.mrb[0].mxu0
  %v727 = vadd.f32 0.0, %v726
  %v728 = vpop.f32.mrb[0].mxu0
  %729 = vmatprep.mubr.f32.mxu0 0.0
  %730 = vmatmul.mubr.f32.gmra.mrb[0].mxu0 %v438
  %v731 = vpop.f32.mrb[0].mxu0
  %v732 = vadd.f32 0.0, %v731
  %v733 = vpop.f32.mrb[0].mxu0
  %734 = vmatprep.mubr.f32.mxu0 0.0
  %735 = vmatmul.mubr.f32.gmra.mrb[0].mxu0 %v441
  %v736 = vpop.f32.mrb[0].mxu0
  %v737 = vadd.f32 0.0, %v736
  %v738 = vpop.f32.mrb[0].mxu0
  %739 = vmatprep.mubr.f32.mxu0 0.0
  %740 = vmatmul.mubr.f32.gmra.mrb[0].mxu0 %v444
  %v741 = vpop.f32.mrb[0].mxu0
  %v742 = vadd.f32 0.0, %v741
  %v743 = vpop.f32.mrb[0].mxu0
  %744 = vmatprep.mubr.f32.mxu0 0.0
  %745 = vmatmul.mubr.f32.gmra.mrb[0].mxu0 %v447
  %v746 = vpop.f32.mrb[0].mxu0
  %v747 = vadd.f32 0.0, %v746
  %v748 = vpop.f32.mrb[0].mxu0
  %749 = vmatprep.mubr.f32.mxu0 0.0
  %750 = vmatmul.mubr.f32.gmra.mrb[0].mxu0 %v450
  %v751 = vpop.f32.mrb[0].mxu0
  %v752 = vadd.f32 0.0, %v751
  %v753 = vpop.f32.mrb[0].mxu0
  %754 = vmatprep.mubr.f32.mxu0 0.0
  %755 = vmatmul.mubr.f32.gmra.mrb[0].mxu0 %v453
  %v756 = vpop.f32.mrb[0].mxu0
  %v757 = vadd.f32 0.0, %v756
  %v758 = vpop.f32.mrb[0].mxu0
  %759 = vmatprep.mubr.f32.mxu0 0.0
  %760 = vmatmul.mubr.f32.gmra.mrb[0].mxu0 %v456
  %v761 = vpop.f32.mrb[0].mxu0
  %v762 = vadd.f32 0.0, %v761
  %v763 = vpop.f32.mrb[0].mxu0
  %764 = vmatprep.mubr.f32.mxu0 0.0
  %765 = vmatmul.mubr.f32.gmra.mrb[0].mxu0 %v459
  %v766 = vpop.f32.mrb[0].mxu0
  %v767 = vadd.f32 0.0, %v766
  %v768 = vpop.f32.mrb[0].mxu0
  %769 = vmatprep.mubr.f32.mxu0 0.0
  %770 = vmatmul.mubr.f32.gmra.mrb[0].mxu0 %v462
  %v771 = vpop.f32.mrb[0].mxu0
  %v772 = vadd.f32 0.0, %v771
  %v773 = vpop.f32.mrb[0].mxu0
  %774 = vmatprep.mubr.f32.mxu0 0.0
  %775 = vmatmul.mubr.f32.gmra.mrb[0].mxu0 %v465
  %v776 = vpop.f32.mrb[0].mxu0
  %v777 = vadd.f32 0.0, %v776
  %v778 = vpop.f32.mrb[0].mxu0
  %779 = vmatprep.mubr.f32.mxu0 0.0
  %780 = vmatmul.mubr.f32.gmra.mrb[0].mxu0 %v468
  %v781 = vpop.f32.mrb[0].mxu0
  %v782 = vadd.f32 0.0, %v781
  %v783 = vpop.f32.mrb[0].mxu0
  %784 = vmatprep.mubr.f32.mxu0 0.0
  %785 = vmatmul.mubr.f32.gmra.mrb[0].mxu0 %v471
  %v786 = vpop.f32.mrb[0].mxu0
  %v787 = vadd.f32 0.0, %v786
  %v788 = vpop.f32.mrb[0].mxu0
  %789 = vmatprep.mubr.f32.mxu0 0.0
  %790 = vmatmul.mubr.f32.gmra.mrb[0].mxu0 %v474
  %v791 = vpop.f32.mrb[0].mxu0
  %v792 = vadd.f32 0.0, %v791
  %v793 = vpop.f32.mrb[0].mxu0
  %794 = vmatprep.mubr.f32.mxu0 0.0
  %795 = vmatmul.mubr.f32.gmra.mrb[0].mxu0 %v477
  %v796 = vpop.f32.mrb[0].mxu0
  %v797 = vadd.f32 0.0, %v796
  %v798 = vpop.f32.mrb[0].mxu0
  %799 = vmatprep.mubr.f32.mxu0 0.0
  %800 = vmatmul.mubr.f32.gmra.mrb[0].mxu0 %v480
  %v801 = vpop.f32.mrb[0].mxu0
  %v802 = vadd.f32 0.0, %v801
  %v803 = vpop.f32.mrb[0].mxu0
  %804 = vmatprep.mubr.f32.mxu0 0.0
  %805 = vmatmul.mubr.f32.gmra.mrb[0].mxu0 %v483
  %v806 = vpop.f32.mrb[0].mxu0
  %v807 = vadd.f32 0.0, %v806
  %v808 = vpop.f32.mrb[0].mxu0
  %809 = vmatprep.mubr.f32.mxu0 0.0
  %810 = vmatmul.mubr.f32.gmra.mrb[0].mxu0 %v486
  %v811 = vpop.f32.mrb[0].mxu0
  %v812 = vadd.f32 0.0, %v811
  %v813 = vpop.f32.mrb[0].mxu0
  %814 = vmatprep.mubr.f32.mxu0 0.0
  %815 = vmatmul.mubr.f32.gmra.mrb[0].mxu0 %v489
  %v816 = vpop.f32.mrb[0].mxu0
  %v817 = vadd.f32 0.0, %v816
  %v818 = vpop.f32.mrb[0].mxu0
  %819 = vmatprep.mubr.f32.mxu0 0.0
  %820 = vmatmul.mubr.f32.gmra.mrb[0].mxu0 %v492
  %v821 = vpop.f32.mrb[0].mxu0
  %v822 = vadd.f32 0.0, %v821
  %v823 = vpop.f32.mrb[0].mxu0
  %824 = vmatprep.mubr.f32.mxu0 0.0
  %825 = vmatmul.mubr.f32.gmra.mrb[0].mxu0 %v495
  %v826 = vpop.f32.mrb[0].mxu0
  %v827 = vadd.f32 0.0, %v826
  %v828 = vpop.f32.mrb[0].mxu0
  %829 = vmatprep.mubr.f32.mxu0 0.0
  %830 = vmatmul.mubr.f32.gmra.mrb[0].mxu0 %v498
  %v831 = vpop.f32.mrb[0].mxu0
  %v832 = vadd.f32 0.0, %v831
  %v833 = vpop.f32.mrb[0].mxu0
  %834 = vmatprep.mubr.f32.mxu0 0.0
  %835 = vmatmul.mubr.f32.gmra.mrb[0].mxu0 %v501
  %v836 = vpop.f32.mrb[0].mxu0
  %v837 = vadd.f32 0.0, %v836
  %v838 = vpop.f32.mrb[0].mxu0
  %839 = vmatprep.mubr.f32.mxu0 0.0
  %840 = vmatmul.mubr.f32.gmra.mrb[0].mxu0 %v504
  %v841 = vpop.f32.mrb[0].mxu0
  %v842 = vadd.f32 0.0, %v841
  %v843 = vpop.f32.mrb[0].mxu0
  %844 = vmatprep.mubr.f32.mxu0 0.0
  %845 = vmatmul.mubr.f32.gmra.mrb[0].mxu0 %v507
  %v846 = vpop.f32.mrb[0].mxu0
  %v847 = vadd.f32 0.0, %v846
  %v848 = vpop.f32.mrb[0].mxu0
  %849 = vmatprep.mubr.f32.mxu0 0.0
  %850 = vmatmul.mubr.f32.gmra.mrb[0].mxu0 %v510
  %v851 = vpop.f32.mrb[0].mxu0
  %v852 = vadd.f32 0.0, %v851
  %v853 = vpop.f32.mrb[0].mxu0
  %854 = vmatprep.mubr.f32.mxu0 0.0
  %855 = vmatmul.mubr.f32.gmra.mrb[0].mxu0 %v513
  %v856 = vpop.f32.mrb[0].mxu0
  %v857 = vadd.f32 0.0, %v856
  %v858 = vpop.f32.mrb[0].mxu0
  %859 = vmatprep.mubr.f32.mxu0 0.0
  %860 = vmatmul.mubr.f32.gmra.mrb[0].mxu0 %v516
  %v861 = vpop.f32.mrb[0].mxu0
  %v862 = vadd.f32 0.0, %v861
  %v863 = vpop.f32.mrb[0].mxu0
  %864 = vmatprep.mubr.f32.mxu0 0.0
  %865 = vmatmul.mubr.f32.gmra.mrb[0].mxu0 %v519
  %v866 = vpop.f32.mrb[0].mxu0
  %v867 = vadd.f32 0.0, %v866
  %v868 = vpop.f32.mrb[0].mxu0
  %869 = vmatprep.mubr.f32.mxu0 0.0
  %870 = vmatmul.mubr.f32.gmra.mrb[0].mxu0 %v522
  %v871 = vpop.f32.mrb[0].mxu0
  %v872 = vadd.f32 0.0, %v871
  %v873 = vpop.f32.mrb[0].mxu0
  %874 = vmatprep.mubr.f32.mxu0 0.0
  %875 = vmatmul.mubr.f32.gmra.mrb[0].mxu0 %v525
  %v876 = vpop.f32.mrb[0].mxu0
  %v877 = vadd.f32 0.0, %v876
  %v878 = vpop.f32.mrb[0].mxu0
  %879 = vmatprep.mubr.f32.mxu0 0.0
  %880 = vmatmul.mubr.f32.gmra.mrb[0].mxu0 %v528
  %v881 = vpop.f32.mrb[0].mxu0
  %v882 = vadd.f32 0.0, %v881
  %v883 = vpop.f32.mrb[0].mxu0
  %884 = vmatprep.mubr.f32.mxu0 0.0
  %885 = vmatmul.mubr.f32.gmra.mrb[0].mxu0 %v531
  %v886 = vpop.f32.mrb[0].mxu0
  %v887 = vadd.f32 0.0, %v886
  %v888 = vpop.f32.mrb[0].mxu0
  %889 = vmatprep.mubr.f32.mxu0 0.0
  %890 = vmatmul.mubr.f32.gmra.mrb[0].mxu0 %v534
  %v891 = vpop.f32.mrb[0].mxu0
  %v892 = vadd.f32 0.0, %v891
  %v893 = vpop.f32.mrb[0].mxu0
  %894 = vmatprep.mubr.f32.mxu0 0.0
  %895 = vmatmul.mubr.f32.gmra.mrb[0].mxu0 %v537
  %v896 = vpop.f32.mrb[0].mxu0
  %v897 = vadd.f32 0.0, %v896
  %v898 = vpop.f32.mrb[0].mxu0
  %899 = vmatprep.mubr.f32.mxu0 0.0
  %900 = vmatmul.mubr.f32.gmra.mrb[0].mxu0 %v540
  %v901 = vpop.f32.mrb[0].mxu0
  %v902 = vadd.f32 0.0, %v901
  %v903 = vpop.f32.mrb[0].mxu0
  %904 = vmatprep.mubr.f32.mxu0 0.0
  %905 = vmatmul.mubr.f32.gmra.mrb[0].mxu0 %v543
  %v906 = vpop.f32.mrb[0].mxu0
  %v907 = vadd.f32 0.0, %v906
  %v908 = vpop.f32.mrb[0].mxu0
  %909 = vmatprep.mubr.f32.mxu0 0.0
  %910 = vmatmul.mubr.f32.gmra.mrb[0].mxu0 %v546
  %v911 = vpop.f32.mrb[0].mxu0
  %v912 = vadd.f32 0.0, %v911
  %v913 = vpop.f32.mrb[0].mxu0
  %914 = vmatprep.mubr.f32.mxu0 0.0
  %915 = vmatmul.mubr.f32.gmra.mrb[0].mxu0 %v549
  %v916 = vpop.f32.mrb[0].mxu0
  %v917 = vadd.f32 0.0, %v916
  %v918 = vpop.f32.mrb[0].mxu0
  %919 = vmatprep.mubr.f32.mxu0 0.0
  %920 = vmatmul.mubr.f32.gmra.mrb[0].mxu0 %v552
  %v921 = vpop.f32.mrb[0].mxu0
  %v922 = vadd.f32 0.0, %v921
  %v923 = vpop.f32.mrb[0].mxu0
  %924 = vmatprep.mubr.f32.mxu0 0.0
  %925 = vmatmul.mubr.f32.gmra.mrb[0].mxu0 %v555
  %v926 = vpop.f32.mrb[0].mxu0
  %v927 = vadd.f32 0.0, %v926
  %v928 = vpop.f32.mrb[0].mxu0
  %929 = vmatprep.mubr.f32.mxu0 0.0
  %930 = vmatmul.mubr.f32.gmra.mrb[0].mxu0 %v558
  %v931 = vpop.f32.mrb[0].mxu0
  %v932 = vadd.f32 0.0, %v931
  %v933 = vpop.f32.mrb[0].mxu0
  %934 = vmatprep.mubr.f32.mxu0 0.0
  %935 = vmatmul.mubr.f32.gmra.mrb[0].mxu0 %v561
  %v936 = vpop.f32.mrb[0].mxu0
  %v937 = vadd.f32 0.0, %v936
  %v938 = vpop.f32.mrb[0].mxu0
  %939 = vmatprep.mubr.f32.mxu0 0.0
  %940 = vmatmul.mubr.f32.gmra.mrb[0].mxu0 %v564
  %v941 = vpop.f32.mrb[0].mxu0
  %v942 = vadd.f32 0.0, %v941
  %v943 = vpop.f32.mrb[0].mxu0
  %944 = vmatprep.mubr.f32.mxu0 0.0
  %945 = vmatmul.mubr.f32.gmra.mrb[0].mxu0 %v567
  %v946 = vpop.f32.mrb[0].mxu0
  %v947 = vadd.f32 0.0, %v946
  %v948 = vpop.f32.mrb[0].mxu0
  %949 = vmatprep.mubr.f32.mxu0 0.0
  %950 = vmatmul.mubr.f32.gmra.mrb[0].mxu0 %v570
  %v951 = vpop.f32.mrb[0].mxu0
  %v952 = vadd.f32 0.0, %v951
  %v953 = vpop.f32.mrb[0].mxu0
  %954 = vmatprep.mubr.f32.mxu0 0.0
  %955 = vmatmul.mubr.f32.gmra.mrb[0].mxu0 %v573
  %v956 = vpop.f32.mrb[0].mxu0
  %v957 = vadd.f32 0.0, %v956
  %v958 = vpop.f32.mrb[0].mxu0
  %959 = vmatprep.mubr.f32.mxu0 0.0
  %960 = vmatmul.mubr.f32.gmra.mrb[0].mxu0 %v576
  %v961 = vpop.f32.mrb[0].mxu0
  %v962 = vadd.f32 0.0, %v961
  %v963 = vpop.f32.mrb[0].mxu0
  %964 = vmatprep.mubr.f32.mxu0 0.0
  %965 = vmatmul.mubr.f32.gmra.mrb[0].mxu0 %v579
  %v966 = vpop.f32.mrb[0].mxu0
  %v967 = vadd.f32 0.0, %v966
  %v968 = vpop.f32.mrb[0].mxu0
  %969 = vdwg.mxu0
  %v971 = vsel %vm44, %v261, 0
  %v974 = vsel %vm44, %v262, 0
  %v977 = vsel %vm44, %v263, 0
  %v980 = vsel %vm44, %v264, 0
  %v983 = vsel %vm44, %v265, 0
  %v986 = vsel %vm44, %v266, 0
  %v989 = vsel %vm44, %v267, 0
  %v992 = vsel %vm44, %v268, 0
  %v995 = vsel %vm44, %v269, 0
  %v998 = vsel %vm44, %v270, 0
  %v1001 = vsel %vm44, %v271, 0
  %v1004 = vsel %vm44, %v272, 0
  %v1007 = vsel %vm44, %v273, 0
  %v1010 = vsel %vm44, %v274, 0
  %v1013 = vsel %vm44, %v275, 0
  %v1016 = vsel %vm44, %v276, 0
  %v1019 = vsel %vm44, %v277, 0
  %v1022 = vsel %vm44, %v278, 0
  %v1025 = vsel %vm44, %v279, 0
  %v1028 = vsel %vm44, %v280, 0
  %v1031 = vsel %vm44, %v281, 0
  %v1034 = vsel %vm44, %v282, 0
  %v1037 = vsel %vm44, %v283, 0
  %v1040 = vsel %vm44, %v284, 0
  %v1043 = vsel %vm44, %v285, 0
  %v1046 = vsel %vm44, %v286, 0
  %v1049 = vsel %vm44, %v287, 0
  %v1052 = vsel %vm44, %v288, 0
  %v1055 = vsel %vm44, %v289, 0
  %v1058 = vsel %vm44, %v290, 0
  %v1061 = vsel %vm44, %v291, 0
  %v1064 = vsel %vm44, %v292, 0
  %v1067 = vsel %vm44, %v293, 0
  %v1070 = vsel %vm44, %v294, 0
  %v1073 = vsel %vm44, %v295, 0
  %v1076 = vsel %vm44, %v296, 0
  %v1079 = vsel %vm44, %v297, 0
  %v1082 = vsel %vm44, %v298, 0
  %v1085 = vsel %vm44, %v299, 0
  %v1088 = vsel %vm44, %v300, 0
  %v1091 = vsel %vm44, %v301, 0
  %v1094 = vsel %vm44, %v302, 0
  %v1097 = vsel %vm44, %v303, 0
  %v1100 = vsel %vm44, %v304, 0
  %v1103 = vsel %vm44, %v305, 0
  %v1106 = vsel %vm44, %v306, 0
  %v1109 = vsel %vm44, %v307, 0
  %v1112 = vsel %vm44, %v308, 0
  %v1115 = vsel %vm44, %v309, 0
  %v1118 = vsel %vm44, %v310, 0
  %v1121 = vsel %vm44, %v311, 0
  %v1124 = vsel %vm44, %v312, 0
  %v1127 = vsel %vm44, %v313, 0
  %v1130 = vsel %vm44, %v314, 0
  %v1133 = vsel %vm44, %v315, 0
  %v1136 = vsel %vm44, %v316, 0
  %v1139 = vsel %vm44, %v317, 0
  %v1142 = vsel %vm44, %v318, 0
  %v1145 = vsel %vm44, %v319, 0
  %v1148 = vsel %vm44, %v320, 0
  %v1151 = vsel %vm44, %v321, 0
  %v1154 = vsel %vm44, %v322, 0
  %v1157 = vsel %vm44, %v323, 0
  %v1160 = vsel %vm44, %v324, 0
  %v1163 = vsel %vm581, %v26, 0
  %1165 = vmatprep.subr.mxu0 0.0
  %1166 = vmatpush1.msra.mxu0 %v1163
  %1167 = vmatprep.subr.mxu0 0.0
  %1168 = vmatpush1.msra.mxu0 0.0
  %1169 = vmatprep.subr.mxu0 0.0
  %1170 = vmatpush1.msra.mxu0 0.0
  %1171 = vmatprep.subr.mxu0 0.0
  %1172 = vmatpush1.msra.mxu0 0.0
  %1173 = vmatprep.subr.mxu0 0.0
  %1174 = vmatpush1.msra.mxu0 0.0
  %1175 = vmatprep.subr.mxu0 0.0
  %1176 = vmatpush1.msra.mxu0 0.0
  %1177 = vmatprep.subr.mxu0 0.0
  %1178 = vmatpush1.msra.mxu0 0.0
  %1179 = vmatprep.subr.mxu0 0.0
  %1180 = vmatpush1.msra.mxu0 0.0
  %1181 = vmatprep.subr.mxu0 0.0
  %1182 = vmatpush1.msra.mxu0 0.0
  %1183 = vmatprep.subr.mxu0 0.0
  %1184 = vmatpush1.msra.mxu0 0.0
  %1185 = vmatprep.subr.mxu0 0.0
  %1186 = vmatpush1.msra.mxu0 0.0
  %1187 = vmatprep.subr.mxu0 0.0
  %1188 = vmatpush1.msra.mxu0 0.0
  %1189 = vmatprep.subr.mxu0 0.0
  %1190 = vmatpush1.msra.mxu0 0.0
  %1191 = vmatprep.subr.mxu0 0.0
  %1192 = vmatpush1.msra.mxu0 0.0
  %1193 = vmatprep.subr.mxu0 0.0
  %1194 = vmatpush1.msra.mxu0 0.0
  %1195 = vmatprep.subr.mxu0 0.0
  %1196 = vmatpush1.msra.mxu0 0.0
  %1197 = vmatprep.subr.mxu0 0.0
  %1198 = vmatpush1.msra.mxu0 0.0
  %1199 = vmatprep.subr.mxu0 0.0
  %1200 = vmatpush1.msra.mxu0 0.0
  %1201 = vmatprep.subr.mxu0 0.0
  %1202 = vmatpush1.msra.mxu0 0.0
  %1203 = vmatprep.subr.mxu0 0.0
  %1204 = vmatpush1.msra.mxu0 0.0
  %1205 = vmatprep.subr.mxu0 0.0
  %1206 = vmatpush1.msra.mxu0 0.0
  %1207 = vmatprep.subr.mxu0 0.0
  %1208 = vmatpush1.msra.mxu0 0.0
  %1209 = vmatprep.subr.mxu0 0.0
  %1210 = vmatpush1.msra.mxu0 0.0
  %1211 = vmatprep.subr.mxu0 0.0
  %1212 = vmatpush1.msra.mxu0 0.0
  %1213 = vmatprep.subr.mxu0 0.0
  %1214 = vmatpush1.msra.mxu0 0.0
  %1215 = vmatprep.subr.mxu0 0.0
  %1216 = vmatpush1.msra.mxu0 0.0
  %1217 = vmatprep.subr.mxu0 0.0
  %1218 = vmatpush1.msra.mxu0 0.0
  %1219 = vmatprep.subr.mxu0 0.0
  %1220 = vmatpush1.msra.mxu0 0.0
  %1221 = vmatprep.subr.mxu0 0.0
  %1222 = vmatpush1.msra.mxu0 0.0
  %1223 = vmatprep.subr.mxu0 0.0
  %1224 = vmatpush1.msra.mxu0 0.0
  %1225 = vmatprep.subr.mxu0 0.0
  %1226 = vmatpush1.msra.mxu0 0.0
  %1227 = vmatprep.subr.mxu0 0.0
  %1228 = vmatpush1.msra.mxu0 0.0
  %1229 = vmatprep.mubr.f32.mxu0 0.0
  %1230 = vmatmul.mubr.f32.gmra.mrb[0].mxu0 %v971
  %v1231 = vpop.f32.mrb[0].mxu0
  %v1232 = vadd.f32 %v652, %v1231
  %v1233 = vpop.f32.mrb[0].mxu0
  %1234 = vmatprep.mubr.f32.mxu0 0.0
  %1235 = vmatmul.mubr.f32.gmra.mrb[0].mxu0 %v974
  %v1236 = vpop.f32.mrb[0].mxu0
  %v1237 = vadd.f32 %v657, %v1236
  %v1238 = vpop.f32.mrb[0].mxu0
  %1239 = vmatprep.mubr.f32.mxu0 0.0
  %1240 = vmatmul.mubr.f32.gmra.mrb[0].mxu0 %v977
  %v1241 = vpop.f32.mrb[0].mxu0
  %v1242 = vadd.f32 %v662, %v1241
  %v1243 = vpop.f32.mrb[0].mxu0
  %1244 = vmatprep.mubr.f32.mxu0 0.0
  %1245 = vmatmul.mubr.f32.gmra.mrb[0].mxu0 %v980
  %v1246 = vpop.f32.mrb[0].mxu0
  %v1247 = vadd.f32 %v667, %v1246
  %v1248 = vpop.f32.mrb[0].mxu0
  %1249 = vmatprep.mubr.f32.mxu0 0.0
  %1250 = vmatmul.mubr.f32.gmra.mrb[0].mxu0 %v983
  %v1251 = vpop.f32.mrb[0].mxu0
  %v1252 = vadd.f32 %v672, %v1251
  %v1253 = vpop.f32.mrb[0].mxu0
  %1254 = vmatprep.mubr.f32.mxu0 0.0
  %1255 = vmatmul.mubr.f32.gmra.mrb[0].mxu0 %v986
  %v1256 = vpop.f32.mrb[0].mxu0
  %v1257 = vadd.f32 %v677, %v1256
  %v1258 = vpop.f32.mrb[0].mxu0
  %1259 = vmatprep.mubr.f32.mxu0 0.0
  %1260 = vmatmul.mubr.f32.gmra.mrb[0].mxu0 %v989
  %v1261 = vpop.f32.mrb[0].mxu0
  %v1262 = vadd.f32 %v682, %v1261
  %v1263 = vpop.f32.mrb[0].mxu0
  %1264 = vmatprep.mubr.f32.mxu0 0.0
  %1265 = vmatmul.mubr.f32.gmra.mrb[0].mxu0 %v992
  %v1266 = vpop.f32.mrb[0].mxu0
  %v1267 = vadd.f32 %v687, %v1266
  %v1268 = vpop.f32.mrb[0].mxu0
  %1269 = vmatprep.mubr.f32.mxu0 0.0
  %1270 = vmatmul.mubr.f32.gmra.mrb[0].mxu0 %v995
  %v1271 = vpop.f32.mrb[0].mxu0
  %v1272 = vadd.f32 %v692, %v1271
  %v1273 = vpop.f32.mrb[0].mxu0
  %1274 = vmatprep.mubr.f32.mxu0 0.0
  %1275 = vmatmul.mubr.f32.gmra.mrb[0].mxu0 %v998
  %v1276 = vpop.f32.mrb[0].mxu0
  %v1277 = vadd.f32 %v697, %v1276
  %v1278 = vpop.f32.mrb[0].mxu0
  %1279 = vmatprep.mubr.f32.mxu0 0.0
  %1280 = vmatmul.mubr.f32.gmra.mrb[0].mxu0 %v1001
  %v1281 = vpop.f32.mrb[0].mxu0
  %v1282 = vadd.f32 %v702, %v1281
  %v1283 = vpop.f32.mrb[0].mxu0
  %1284 = vmatprep.mubr.f32.mxu0 0.0
  %1285 = vmatmul.mubr.f32.gmra.mrb[0].mxu0 %v1004
  %v1286 = vpop.f32.mrb[0].mxu0
  %v1287 = vadd.f32 %v707, %v1286
  %v1288 = vpop.f32.mrb[0].mxu0
  %1289 = vmatprep.mubr.f32.mxu0 0.0
  %1290 = vmatmul.mubr.f32.gmra.mrb[0].mxu0 %v1007
  %v1291 = vpop.f32.mrb[0].mxu0
  %v1292 = vadd.f32 %v712, %v1291
  %v1293 = vpop.f32.mrb[0].mxu0
  %1294 = vmatprep.mubr.f32.mxu0 0.0
  %1295 = vmatmul.mubr.f32.gmra.mrb[0].mxu0 %v1010
  %v1296 = vpop.f32.mrb[0].mxu0
  %v1297 = vadd.f32 %v717, %v1296
  %v1298 = vpop.f32.mrb[0].mxu0
  %1299 = vmatprep.mubr.f32.mxu0 0.0
  %1300 = vmatmul.mubr.f32.gmra.mrb[0].mxu0 %v1013
  %v1301 = vpop.f32.mrb[0].mxu0
  %v1302 = vadd.f32 %v722, %v1301
  %v1303 = vpop.f32.mrb[0].mxu0
  %1304 = vmatprep.mubr.f32.mxu0 0.0
  %1305 = vmatmul.mubr.f32.gmra.mrb[0].mxu0 %v1016
  %v1306 = vpop.f32.mrb[0].mxu0
  %v1307 = vadd.f32 %v727, %v1306
  %v1308 = vpop.f32.mrb[0].mxu0
  %1309 = vmatprep.mubr.f32.mxu0 0.0
  %1310 = vmatmul.mubr.f32.gmra.mrb[0].mxu0 %v1019
  %v1311 = vpop.f32.mrb[0].mxu0
  %v1312 = vadd.f32 %v732, %v1311
  %v1313 = vpop.f32.mrb[0].mxu0
  %1314 = vmatprep.mubr.f32.mxu0 0.0
  %1315 = vmatmul.mubr.f32.gmra.mrb[0].mxu0 %v1022
  %v1316 = vpop.f32.mrb[0].mxu0
  %v1317 = vadd.f32 %v737, %v1316
  %v1318 = vpop.f32.mrb[0].mxu0
  %1319 = vmatprep.mubr.f32.mxu0 0.0
  %1320 = vmatmul.mubr.f32.gmra.mrb[0].mxu0 %v1025
  %v1321 = vpop.f32.mrb[0].mxu0
  %v1322 = vadd.f32 %v742, %v1321
  %v1323 = vpop.f32.mrb[0].mxu0
  %1324 = vmatprep.mubr.f32.mxu0 0.0
  %1325 = vmatmul.mubr.f32.gmra.mrb[0].mxu0 %v1028
  %v1326 = vpop.f32.mrb[0].mxu0
  %v1327 = vadd.f32 %v747, %v1326
  %v1328 = vpop.f32.mrb[0].mxu0
  %1329 = vmatprep.mubr.f32.mxu0 0.0
  %1330 = vmatmul.mubr.f32.gmra.mrb[0].mxu0 %v1031
  %v1331 = vpop.f32.mrb[0].mxu0
  %v1332 = vadd.f32 %v752, %v1331
  %v1333 = vpop.f32.mrb[0].mxu0
  %1334 = vmatprep.mubr.f32.mxu0 0.0
  %1335 = vmatmul.mubr.f32.gmra.mrb[0].mxu0 %v1034
  %v1336 = vpop.f32.mrb[0].mxu0
  %v1337 = vadd.f32 %v757, %v1336
  %v1338 = vpop.f32.mrb[0].mxu0
  %1339 = vmatprep.mubr.f32.mxu0 0.0
  %1340 = vmatmul.mubr.f32.gmra.mrb[0].mxu0 %v1037
  %v1341 = vpop.f32.mrb[0].mxu0
  %v1342 = vadd.f32 %v762, %v1341
  %v1343 = vpop.f32.mrb[0].mxu0
  %1344 = vmatprep.mubr.f32.mxu0 0.0
  %1345 = vmatmul.mubr.f32.gmra.mrb[0].mxu0 %v1040
  %v1346 = vpop.f32.mrb[0].mxu0
  %v1347 = vadd.f32 %v767, %v1346
  %v1348 = vpop.f32.mrb[0].mxu0
  %1349 = vmatprep.mubr.f32.mxu0 0.0
  %1350 = vmatmul.mubr.f32.gmra.mrb[0].mxu0 %v1043
  %v1351 = vpop.f32.mrb[0].mxu0
  %v1352 = vadd.f32 %v772, %v1351
  %v1353 = vpop.f32.mrb[0].mxu0
  %1354 = vmatprep.mubr.f32.mxu0 0.0
  %1355 = vmatmul.mubr.f32.gmra.mrb[0].mxu0 %v1046
  %v1356 = vpop.f32.mrb[0].mxu0
  %v1357 = vadd.f32 %v777, %v1356
  %v1358 = vpop.f32.mrb[0].mxu0
  %1359 = vmatprep.mubr.f32.mxu0 0.0
  %1360 = vmatmul.mubr.f32.gmra.mrb[0].mxu0 %v1049
  %v1361 = vpop.f32.mrb[0].mxu0
  %v1362 = vadd.f32 %v782, %v1361
  %v1363 = vpop.f32.mrb[0].mxu0
  %1364 = vmatprep.mubr.f32.mxu0 0.0
  %1365 = vmatmul.mubr.f32.gmra.mrb[0].mxu0 %v1052
  %v1366 = vpop.f32.mrb[0].mxu0
  %v1367 = vadd.f32 %v787, %v1366
  %v1368 = vpop.f32.mrb[0].mxu0
  %1369 = vmatprep.mubr.f32.mxu0 0.0
  %1370 = vmatmul.mubr.f32.gmra.mrb[0].mxu0 %v1055
  %v1371 = vpop.f32.mrb[0].mxu0
  %v1372 = vadd.f32 %v792, %v1371
  %v1373 = vpop.f32.mrb[0].mxu0
  %1374 = vmatprep.mubr.f32.mxu0 0.0
  %1375 = vmatmul.mubr.f32.gmra.mrb[0].mxu0 %v1058
  %v1376 = vpop.f32.mrb[0].mxu0
  %v1377 = vadd.f32 %v797, %v1376
  %v1378 = vpop.f32.mrb[0].mxu0
  %1379 = vmatprep.mubr.f32.mxu0 0.0
  %1380 = vmatmul.mubr.f32.gmra.mrb[0].mxu0 %v1061
  %v1381 = vpop.f32.mrb[0].mxu0
  %v1382 = vadd.f32 %v802, %v1381
  %v1383 = vpop.f32.mrb[0].mxu0
  %1384 = vmatprep.mubr.f32.mxu0 0.0
  %1385 = vmatmul.mubr.f32.gmra.mrb[0].mxu0 %v1064
  %v1386 = vpop.f32.mrb[0].mxu0
  %v1387 = vadd.f32 %v807, %v1386
  %v1388 = vpop.f32.mrb[0].mxu0
  %1389 = vmatprep.mubr.f32.mxu0 0.0
  %1390 = vmatmul.mubr.f32.gmra.mrb[0].mxu0 %v1067
  %v1391 = vpop.f32.mrb[0].mxu0
  %v1392 = vadd.f32 %v812, %v1391
  %v1393 = vpop.f32.mrb[0].mxu0
  %1394 = vmatprep.mubr.f32.mxu0 0.0
  %1395 = vmatmul.mubr.f32.gmra.mrb[0].mxu0 %v1070
  %v1396 = vpop.f32.mrb[0].mxu0
  %v1397 = vadd.f32 %v817, %v1396
  %v1398 = vpop.f32.mrb[0].mxu0
  %1399 = vmatprep.mubr.f32.mxu0 0.0
  %1400 = vmatmul.mubr.f32.gmra.mrb[0].mxu0 %v1073
  %v1401 = vpop.f32.mrb[0].mxu0
  %v1402 = vadd.f32 %v822, %v1401
  %v1403 = vpop.f32.mrb[0].mxu0
  %1404 = vmatprep.mubr.f32.mxu0 0.0
  %1405 = vmatmul.mubr.f32.gmra.mrb[0].mxu0 %v1076
  %v1406 = vpop.f32.mrb[0].mxu0
  %v1407 = vadd.f32 %v827, %v1406
  %v1408 = vpop.f32.mrb[0].mxu0
  %1409 = vmatprep.mubr.f32.mxu0 0.0
  %1410 = vmatmul.mubr.f32.gmra.mrb[0].mxu0 %v1079
  %v1411 = vpop.f32.mrb[0].mxu0
  %v1412 = vadd.f32 %v832, %v1411
  %v1413 = vpop.f32.mrb[0].mxu0
  %1414 = vmatprep.mubr.f32.mxu0 0.0
  %1415 = vmatmul.mubr.f32.gmra.mrb[0].mxu0 %v1082
  %v1416 = vpop.f32.mrb[0].mxu0
  %v1417 = vadd.f32 %v837, %v1416
  %v1418 = vpop.f32.mrb[0].mxu0
  %1419 = vmatprep.mubr.f32.mxu0 0.0
  %1420 = vmatmul.mubr.f32.gmra.mrb[0].mxu0 %v1085
  %v1421 = vpop.f32.mrb[0].mxu0
  %v1422 = vadd.f32 %v842, %v1421
  %v1423 = vpop.f32.mrb[0].mxu0
  %1424 = vmatprep.mubr.f32.mxu0 0.0
  %1425 = vmatmul.mubr.f32.gmra.mrb[0].mxu0 %v1088
  %v1426 = vpop.f32.mrb[0].mxu0
  %v1427 = vadd.f32 %v847, %v1426
  %v1428 = vpop.f32.mrb[0].mxu0
  %1429 = vmatprep.mubr.f32.mxu0 0.0
  %1430 = vmatmul.mubr.f32.gmra.mrb[0].mxu0 %v1091
  %v1431 = vpop.f32.mrb[0].mxu0
  %v1432 = vadd.f32 %v852, %v1431
  %v1433 = vpop.f32.mrb[0].mxu0
  %1434 = vmatprep.mubr.f32.mxu0 0.0
  %1435 = vmatmul.mubr.f32.gmra.mrb[0].mxu0 %v1094
  %v1436 = vpop.f32.mrb[0].mxu0
  %v1437 = vadd.f32 %v857, %v1436
  %v1438 = vpop.f32.mrb[0].mxu0
  %1439 = vmatprep.mubr.f32.mxu0 0.0
  %1440 = vmatmul.mubr.f32.gmra.mrb[0].mxu0 %v1097
  %v1441 = vpop.f32.mrb[0].mxu0
  %v1442 = vadd.f32 %v862, %v1441
  %v1443 = vpop.f32.mrb[0].mxu0
  %1444 = vmatprep.mubr.f32.mxu0 0.0
  %1445 = vmatmul.mubr.f32.gmra.mrb[0].mxu0 %v1100
  %v1446 = vpop.f32.mrb[0].mxu0
  %v1447 = vadd.f32 %v867, %v1446
  %v1448 = vpop.f32.mrb[0].mxu0
  %1449 = vmatprep.mubr.f32.mxu0 0.0
  %1450 = vmatmul.mubr.f32.gmra.mrb[0].mxu0 %v1103
  %v1451 = vpop.f32.mrb[0].mxu0
  %v1452 = vadd.f32 %v872, %v1451
  %v1453 = vpop.f32.mrb[0].mxu0
  %1454 = vmatprep.mubr.f32.mxu0 0.0
  %1455 = vmatmul.mubr.f32.gmra.mrb[0].mxu0 %v1106
  %v1456 = vpop.f32.mrb[0].mxu0
  %v1457 = vadd.f32 %v877, %v1456
  %v1458 = vpop.f32.mrb[0].mxu0
  %1459 = vmatprep.mubr.f32.mxu0 0.0
  %1460 = vmatmul.mubr.f32.gmra.mrb[0].mxu0 %v1109
  %v1461 = vpop.f32.mrb[0].mxu0
  %v1462 = vadd.f32 %v882, %v1461
  %v1463 = vpop.f32.mrb[0].mxu0
  %1464 = vmatprep.mubr.f32.mxu0 0.0
  %1465 = vmatmul.mubr.f32.gmra.mrb[0].mxu0 %v1112
  %v1466 = vpop.f32.mrb[0].mxu0
  %v1467 = vadd.f32 %v887, %v1466
  %v1468 = vpop.f32.mrb[0].mxu0
  %1469 = vmatprep.mubr.f32.mxu0 0.0
  %1470 = vmatmul.mubr.f32.gmra.mrb[0].mxu0 %v1115
  %v1471 = vpop.f32.mrb[0].mxu0
  %v1472 = vadd.f32 %v892, %v1471
  %v1473 = vpop.f32.mrb[0].mxu0
  %1474 = vmatprep.mubr.f32.mxu0 0.0
  %1475 = vmatmul.mubr.f32.gmra.mrb[0].mxu0 %v1118
  %v1476 = vpop.f32.mrb[0].mxu0
  %v1477 = vadd.f32 %v897, %v1476
  %v1478 = vpop.f32.mrb[0].mxu0
  %1479 = vmatprep.mubr.f32.mxu0 0.0
  %1480 = vmatmul.mubr.f32.gmra.mrb[0].mxu0 %v1121
  %v1481 = vpop.f32.mrb[0].mxu0
  %v1482 = vadd.f32 %v902, %v1481
  %v1483 = vpop.f32.mrb[0].mxu0
  %1484 = vmatprep.mubr.f32.mxu0 0.0
  %1485 = vmatmul.mubr.f32.gmra.mrb[0].mxu0 %v1124
  %v1486 = vpop.f32.mrb[0].mxu0
  %v1487 = vadd.f32 %v907, %v1486
  %v1488 = vpop.f32.mrb[0].mxu0
  %1489 = vmatprep.mubr.f32.mxu0 0.0
  %1490 = vmatmul.mubr.f32.gmra.mrb[0].mxu0 %v1127
  %v1491 = vpop.f32.mrb[0].mxu0
  %v1492 = vadd.f32 %v912, %v1491
  %v1493 = vpop.f32.mrb[0].mxu0
  %1494 = vmatprep.mubr.f32.mxu0 0.0
  %1495 = vmatmul.mubr.f32.gmra.mrb[0].mxu0 %v1130
  %v1496 = vpop.f32.mrb[0].mxu0
  %v1497 = vadd.f32 %v917, %v1496
  %v1498 = vpop.f32.mrb[0].mxu0
  %1499 = vmatprep.mubr.f32.mxu0 0.0
  %1500 = vmatmul.mubr.f32.gmra.mrb[0].mxu0 %v1133
  %v1501 = vpop.f32.mrb[0].mxu0
  %v1502 = vadd.f32 %v922, %v1501
  %v1503 = vpop.f32.mrb[0].mxu0
  %1504 = vmatprep.mubr.f32.mxu0 0.0
  %1505 = vmatmul.mubr.f32.gmra.mrb[0].mxu0 %v1136
  %v1506 = vpop.f32.mrb[0].mxu0
  %v1507 = vadd.f32 %v927, %v1506
  %v1508 = vpop.f32.mrb[0].mxu0
  %1509 = vmatprep.mubr.f32.mxu0 0.0
  %1510 = vmatmul.mubr.f32.gmra.mrb[0].mxu0 %v1139
  %v1511 = vpop.f32.mrb[0].mxu0
  %v1512 = vadd.f32 %v932, %v1511
  %v1513 = vpop.f32.mrb[0].mxu0
  %1514 = vmatprep.mubr.f32.mxu0 0.0
  %1515 = vmatmul.mubr.f32.gmra.mrb[0].mxu0 %v1142
  %v1516 = vpop.f32.mrb[0].mxu0
  %v1517 = vadd.f32 %v937, %v1516
  %v1518 = vpop.f32.mrb[0].mxu0
  %1519 = vmatprep.mubr.f32.mxu0 0.0
  %1520 = vmatmul.mubr.f32.gmra.mrb[0].mxu0 %v1145
  %v1521 = vpop.f32.mrb[0].mxu0
  %v1522 = vadd.f32 %v942, %v1521
  %v1523 = vpop.f32.mrb[0].mxu0
  %1524 = vmatprep.mubr.f32.mxu0 0.0
  %1525 = vmatmul.mubr.f32.gmra.mrb[0].mxu0 %v1148
  %v1526 = vpop.f32.mrb[0].mxu0
  %v1527 = vadd.f32 %v947, %v1526
  %v1528 = vpop.f32.mrb[0].mxu0
  %1529 = vmatprep.mubr.f32.mxu0 0.0
  %1530 = vmatmul.mubr.f32.gmra.mrb[0].mxu0 %v1151
  %v1531 = vpop.f32.mrb[0].mxu0
  %v1532 = vadd.f32 %v952, %v1531
  %v1533 = vpop.f32.mrb[0].mxu0
  %1534 = vmatprep.mubr.f32.mxu0 0.0
  %1535 = vmatmul.mubr.f32.gmra.mrb[0].mxu0 %v1154
  %v1536 = vpop.f32.mrb[0].mxu0
  %v1537 = vadd.f32 %v957, %v1536
  %v1538 = vpop.f32.mrb[0].mxu0
  %1539 = vmatprep.mubr.f32.mxu0 0.0
  %1540 = vmatmul.mubr.f32.gmra.mrb[0].mxu0 %v1157
  %v1541 = vpop.f32.mrb[0].mxu0
  %v1542 = vadd.f32 %v962, %v1541
  %v1543 = vpop.f32.mrb[0].mxu0
  %1544 = vmatprep.mubr.f32.mxu0 0.0
  %1545 = vmatmul.mubr.f32.gmra.mrb[0].mxu0 %v1160
  %v1546 = vpop.f32.mrb[0].mxu0
  %v1547 = vadd.f32 %v967, %v1546
  %v1548 = vpop.f32.mrb[0].mxu0
  %1549 = vdwg.mxu0
  %v1550 = vld [vmem:[#allocation2 + $0x2] sm:$0xff]
  %v1551 = vld [vmem:[#allocation2 + $0xa] sm:$0xff]
  %v1552 = vld [vmem:[#allocation2 + $0x1a] sm:$0xff]
  %v1553 = vld [vmem:[#allocation2 + $0x22] sm:$0xff]
  %v1554 = vld [vmem:[#allocation2 + $0x32] sm:$0xff]
  %v1555 = vld [vmem:[#allocation2 + $0x3a] sm:$0xff]
  %v1556 = vld [vmem:[#allocation2 + $0x4a] sm:$0xff]
  %v1557 = vld [vmem:[#allocation2 + $0x52] sm:$0xff]
  %v1558 = vld [vmem:[#allocation2 + $0x62] sm:$0xff]
  %v1559 = vld [vmem:[#allocation2 + $0x6a] sm:$0xff]
  %v1560 = vld [vmem:[#allocation2 + $0x7a] sm:$0xff]
  %v1561 = vld [vmem:[#allocation2 + $0x82] sm:$0xff]
  %v1562 = vld [vmem:[#allocation2 + $0x92] sm:$0xff]
  %v1563 = vld [vmem:[#allocation2 + $0x9a] sm:$0xff]
  %v1564 = vld [vmem:[#allocation2 + $0xaa] sm:$0xff]
  %v1565 = vld [vmem:[#allocation2 + $0xb2] sm:$0xff]
  %v1566 = vld [vmem:[#allocation2 + $0xc2] sm:$0xff]
  %v1567 = vld [vmem:[#allocation2 + $0xca] sm:$0xff]
  %v1568 = vld [vmem:[#allocation2 + $0xda] sm:$0xff]
  %v1569 = vld [vmem:[#allocation2 + $0xe2] sm:$0xff]
  %v1570 = vld [vmem:[#allocation2 + $0xf2] sm:$0xff]
  %v1571 = vld [vmem:[#allocation2 + $0xfa] sm:$0xff]
  %v1572 = vld [vmem:[#allocation2 + $0x10a] sm:$0xff]
  %v1573 = vld [vmem:[#allocation2 + $0x112] sm:$0xff]
  %v1574 = vld [vmem:[#allocation2 + $0x122] sm:$0xff]
  %v1575 = vld [vmem:[#allocation2 + $0x12a] sm:$0xff]
  %v1576 = vld [vmem:[#allocation2 + $0x13a] sm:$0xff]
  %v1577 = vld [vmem:[#allocation2 + $0x142] sm:$0xff]
  %v1578 = vld [vmem:[#allocation2 + $0x152] sm:$0xff]
  %v1579 = vld [vmem:[#allocation2 + $0x15a] sm:$0xff]
  %v1580 = vld [vmem:[#allocation2 + $0x16a] sm:$0xff]
  %v1581 = vld [vmem:[#allocation2 + $0x172] sm:$0xff]
  %v1582 = vld [vmem:[#allocation2 + $0x1b2] sm:$0xff]
  %v1583 = vld [vmem:[#allocation2 + $0x1ba] sm:$0xff]
  %v1584 = vld [vmem:[#allocation2 + $0x1ca] sm:$0xff]
  %v1585 = vld [vmem:[#allocation2 + $0x1d2] sm:$0xff]
  %v1586 = vld [vmem:[#allocation2 + $0x1e2] sm:$0xff]
  %v1587 = vld [vmem:[#allocation2 + $0x1ea] sm:$0xff]
  %v1588 = vld [vmem:[#allocation2 + $0x1fa] sm:$0xff]
  %v1589 = vld [vmem:[#allocation2 + $0x202] sm:$0xff]
  %v1590 = vld [vmem:[#allocation2 + $0x212] sm:$0xff]
  %v1591 = vld [vmem:[#allocation2 + $0x21a] sm:$0xff]
  %v1592 = vld [vmem:[#allocation2 + $0x22a] sm:$0xff]
  %v1593 = vld [vmem:[#allocation2 + $0x232] sm:$0xff]
  %v1594 = vld [vmem:[#allocation2 + $0x242] sm:$0xff]
  %v1595 = vld [vmem:[#allocation2 + $0x24a] sm:$0xff]
  %v1596 = vld [vmem:[#allocation2 + $0x25a] sm:$0xff]
  %v1597 = vld [vmem:[#allocation2 + $0x262] sm:$0xff]
  %v1598 = vld [vmem:[#allocation2 + $0x272] sm:$0xff]
  %v1599 = vld [vmem:[#allocation2 + $0x27a] sm:$0xff]
  %v1600 = vld [vmem:[#allocation2 + $0x28a] sm:$0xff]
  %v1601 = vld [vmem:[#allocation2 + $0x292] sm:$0xff]
  %v1602 = vld [vmem:[#allocation2 + $0x2a2] sm:$0xff]
  %v1603 = vld [vmem:[#allocation2 + $0x2aa] sm:$0xff]
  %v1604 = vld [vmem:[#allocation2 + $0x2ba] sm:$0xff]
  %v1605 = vld [vmem:[#allocation2 + $0x2c2] sm:$0xff]
  %v1606 = vld [vmem:[#allocation2 + $0x2d2] sm:$0xff]
  %v1607 = vld [vmem:[#allocation2 + $0x2da] sm:$0xff]
  %v1608 = vld [vmem:[#allocation2 + $0x2ea] sm:$0xff]
  %v1609 = vld [vmem:[#allocation2 + $0x2f2] sm:$0xff]
  %v1610 = vld [vmem:[#allocation2 + $0x302] sm:$0xff]
  %v1611 = vld [vmem:[#allocation2 + $0x30a] sm:$0xff]
  %v1612 = vld [vmem:[#allocation2 + $0x31a] sm:$0xff]
  %v1613 = vld [vmem:[#allocation2 + $0x322] sm:$0xff]
  %v1615 = vsel %vm44, %v1550, 0
  %v1618 = vsel %vm44, %v1551, 0
  %v1621 = vsel %vm44, %v1552, 0
  %v1624 = vsel %vm44, %v1553, 0
  %v1627 = vsel %vm44, %v1554, 0
  %v1630 = vsel %vm44, %v1555, 0
  %v1633 = vsel %vm44, %v1556, 0
  %v1636 = vsel %vm44, %v1557, 0
  %v1639 = vsel %vm44, %v1558, 0
  %v1642 = vsel %vm44, %v1559, 0
  %v1645 = vsel %vm44, %v1560, 0
  %v1648 = vsel %vm44, %v1561, 0
  %v1651 = vsel %vm44, %v1562, 0
  %v1654 = vsel %vm44, %v1563, 0
  %v1657 = vsel %vm44, %v1564, 0
  %v1660 = vsel %vm44, %v1565, 0
  %v1663 = vsel %vm44, %v1566, 0
  %v1666 = vsel %vm44, %v1567, 0
  %v1669 = vsel %vm44, %v1568, 0
  %v1672 = vsel %vm44, %v1569, 0
  %v1675 = vsel %vm44, %v1570, 0
  %v1678 = vsel %vm44, %v1571, 0
  %v1681 = vsel %vm44, %v1572, 0
  %v1684 = vsel %vm44, %v1573, 0
  %v1687 = vsel %vm44, %v1574, 0
  %v1690 = vsel %vm44, %v1575, 0
  %v1693 = vsel %vm44, %v1576, 0
  %v1696 = vsel %vm44, %v1577, 0
  %v1699 = vsel %vm44, %v1578, 0
  %v1702 = vsel %vm44, %v1579, 0
  %v1705 = vsel %vm44, %v1580, 0
  %v1708 = vsel %vm44, %v1581, 0
  %v1711 = vsel %vm44, %v1582, 0
  %v1714 = vsel %vm44, %v1583, 0
  %v1717 = vsel %vm44, %v1584, 0
  %v1720 = vsel %vm44, %v1585, 0
  %v1723 = vsel %vm44, %v1586, 0
  %v1726 = vsel %vm44, %v1587, 0
  %v1729 = vsel %vm44, %v1588, 0
  %v1732 = vsel %vm44, %v1589, 0
  %v1735 = vsel %vm44, %v1590, 0
  %v1738 = vsel %vm44, %v1591, 0
  %v1741 = vsel %vm44, %v1592, 0
  %v1744 = vsel %vm44, %v1593, 0
  %v1747 = vsel %vm44, %v1594, 0
  %v1750 = vsel %vm44, %v1595, 0
  %v1753 = vsel %vm44, %v1596, 0
  %v1756 = vsel %vm44, %v1597, 0
  %v1759 = vsel %vm44, %v1598, 0
  %v1762 = vsel %vm44, %v1599, 0
  %v1765 = vsel %vm44, %v1600, 0
  %v1768 = vsel %vm44, %v1601, 0
  %v1771 = vsel %vm44, %v1602, 0
  %v1774 = vsel %vm44, %v1603, 0
  %v1777 = vsel %vm44, %v1604, 0
  %v1780 = vsel %vm44, %v1605, 0
  %v1783 = vsel %vm44, %v1606, 0
  %v1786 = vsel %vm44, %v1607, 0
  %v1789 = vsel %vm44, %v1608, 0
  %v1792 = vsel %vm44, %v1609, 0
  %v1795 = vsel %vm44, %v1610, 0
  %v1798 = vsel %vm44, %v1611, 0
  %v1801 = vsel %vm44, %v1612, 0
  %v1804 = vsel %vm44, %v1613, 0
  %v1807 = vsel %vm581, %v28, 0
  %1809 = vmatprep.subr.mxu0 0.0
  %1810 = vmatpush1.msra.mxu0 %v1807
  %1811 = vmatprep.subr.mxu0 0.0
  %1812 = vmatpush1.msra.mxu0 0.0
  %1813 = vmatprep.subr.mxu0 0.0
  %1814 = vmatpush1.msra.mxu0 0.0
  %1815 = vmatprep.subr.mxu0 0.0
  %1816 = vmatpush1.msra.mxu0 0.0
  %1817 = vmatprep.subr.mxu0 0.0
  %1818 = vmatpush1.msra.mxu0 0.0
  %1819 = vmatprep.subr.mxu0 0.0
  %1820 = vmatpush1.msra.mxu0 0.0
  %1821 = vmatprep.subr.mxu0 0.0
  %1822 = vmatpush1.msra.mxu0 0.0
  %1823 = vmatprep.subr.mxu0 0.0
  %1824 = vmatpush1.msra.mxu0 0.0
  %1825 = vmatprep.subr.mxu0 0.0
  %1826 = vmatpush1.msra.mxu0 0.0
  %1827 = vmatprep.subr.mxu0 0.0
  %1828 = vmatpush1.msra.mxu0 0.0
  %1829 = vmatprep.subr.mxu0 0.0
  %1830 = vmatpush1.msra.mxu0 0.0
  %1831 = vmatprep.subr.mxu0 0.0
  %1832 = vmatpush1.msra.mxu0 0.0
  %1833 = vmatprep.subr.mxu0 0.0
  %1834 = vmatpush1.msra.mxu0 0.0
  %1835 = vmatprep.subr.mxu0 0.0
  %1836 = vmatpush1.msra.mxu0 0.0
  %1837 = vmatprep.subr.mxu0 0.0
  %1838 = vmatpush1.msra.mxu0 0.0
  %1839 = vmatprep.subr.mxu0 0.0
  %1840 = vmatpush1.msra.mxu0 0.0
  %1841 = vmatprep.subr.mxu0 0.0
  %1842 = vmatpush1.msra.mxu0 0.0
  %1843 = vmatprep.subr.mxu0 0.0
  %1844 = vmatpush1.msra.mxu0 0.0
  %1845 = vmatprep.subr.mxu0 0.0
  %1846 = vmatpush1.msra.mxu0 0.0
  %1847 = vmatprep.subr.mxu0 0.0
  %1848 = vmatpush1.msra.mxu0 0.0
  %1849 = vmatprep.subr.mxu0 0.0
  %1850 = vmatpush1.msra.mxu0 0.0
  %1851 = vmatprep.subr.mxu0 0.0
  %1852 = vmatpush1.msra.mxu0 0.0
  %1853 = vmatprep.subr.mxu0 0.0
  %1854 = vmatpush1.msra.mxu0 0.0
  %1855 = vmatprep.subr.mxu0 0.0
  %1856 = vmatpush1.msra.mxu0 0.0
  %1857 = vmatprep.subr.mxu0 0.0
  %1858 = vmatpush1.msra.mxu0 0.0
  %1859 = vmatprep.subr.mxu0 0.0
  %1860 = vmatpush1.msra.mxu0 0.0
  %1861 = vmatprep.subr.mxu0 0.0
  %1862 = vmatpush1.msra.mxu0 0.0
  %1863 = vmatprep.subr.mxu0 0.0
  %1864 = vmatpush1.msra.mxu0 0.0
  %1865 = vmatprep.subr.mxu0 0.0
  %1866 = vmatpush1.msra.mxu0 0.0
  %1867 = vmatprep.subr.mxu0 0.0
  %1868 = vmatpush1.msra.mxu0 0.0
  %1869 = vmatprep.subr.mxu0 0.0
  %1870 = vmatpush1.msra.mxu0 0.0
  %1871 = vmatprep.subr.mxu0 0.0
  %1872 = vmatpush1.msra.mxu0 0.0
  %1873 = vmatprep.mubr.f32.mxu0 0.0
  %1874 = vmatmul.mubr.f32.gmra.mrb[0].mxu0 %v1615
  %v1875 = vpop.f32.mrb[0].mxu0
  %v1876 = vadd.f32 0.0, %v1875
  %v1877 = vpop.f32.mrb[0].mxu0
  %1878 = vmatprep.mubr.f32.mxu0 0.0
  %1879 = vmatmul.mubr.f32.gmra.mrb[0].mxu0 %v1618
  %v1880 = vpop.f32.mrb[0].mxu0
  %v1881 = vadd.f32 0.0, %v1880
  %v1882 = vpop.f32.mrb[0].mxu0
  %1883 = vmatprep.mubr.f32.mxu0 0.0
  %1884 = vmatmul.mubr.f32.gmra.mrb[0].mxu0 %v1621
  %v1885 = vpop.f32.mrb[0].mxu0
  %v1886 = vadd.f32 0.0, %v1885
  %v1887 = vpop.f32.mrb[0].mxu0
  %1888 = vmatprep.mubr.f32.mxu0 0.0
  %1889 = vmatmul.mubr.f32.gmra.mrb[0].mxu0 %v1624
  %v1890 = vpop.f32.mrb[0].mxu0
  %v1891 = vadd.f32 0.0, %v1890
  %v1892 = vpop.f32.mrb[0].mxu0
  %1893 = vmatprep.mubr.f32.mxu0 0.0
  %1894 = vmatmul.mubr.f32.gmra.mrb[0].mxu0 %v1627
  %v1895 = vpop.f32.mrb[0].mxu0
  %v1896 = vadd.f32 0.0, %v1895
  %v1897 = vpop.f32.mrb[0].mxu0
  %1898 = vmatprep.mubr.f32.mxu0 0.0
  %1899 = vmatmul.mubr.f32.gmra.mrb[0].mxu0 %v1630
  %v1900 = vpop.f32.mrb[0].mxu0
  %v1901 = vadd.f32 0.0, %v1900
  %v1902 = vpop.f32.mrb[0].mxu0
  %1903 = vmatprep.mubr.f32.mxu0 0.0
  %1904 = vmatmul.mubr.f32.gmra.mrb[0].mxu0 %v1633
  %v1905 = vpop.f32.mrb[0].mxu0
  %v1906 = vadd.f32 0.0, %v1905
  %v1907 = vpop.f32.mrb[0].mxu0
  %1908 = vmatprep.mubr.f32.mxu0 0.0
  %1909 = vmatmul.mubr.f32.gmra.mrb[0].mxu0 %v1636
  %v1910 = vpop.f32.mrb[0].mxu0
  %v1911 = vadd.f32 0.0, %v1910
  %v1912 = vpop.f32.mrb[0].mxu0
  %1913 = vmatprep.mubr.f32.mxu0 0.0
  %1914 = vmatmul.mubr.f32.gmra.mrb[0].mxu0 %v1639
  %v1915 = vpop.f32.mrb[0].mxu0
  %v1916 = vadd.f32 0.0, %v1915
  %v1917 = vpop.f32.mrb[0].mxu0
  %1918 = vmatprep.mubr.f32.mxu0 0.0
  %1919 = vmatmul.mubr.f32.gmra.mrb[0].mxu0 %v1642
  %v1920 = vpop.f32.mrb[0].mxu0
  %v1921 = vadd.f32 0.0, %v1920
  %v1922 = vpop.f32.mrb[0].mxu0
  %1923 = vmatprep.mubr.f32.mxu0 0.0
  %1924 = vmatmul.mubr.f32.gmra.mrb[0].mxu0 %v1645
  %v1925 = vpop.f32.mrb[0].mxu0
  %v1926 = vadd.f32 0.0, %v1925
  %v1927 = vpop.f32.mrb[0].mxu0
  %1928 = vmatprep.mubr.f32.mxu0 0.0
  %1929 = vmatmul.mubr.f32.gmra.mrb[0].mxu0 %v1648
  %v1930 = vpop.f32.mrb[0].mxu0
  %v1931 = vadd.f32 0.0, %v1930
  %v1932 = vpop.f32.mrb[0].mxu0
  %1933 = vmatprep.mubr.f32.mxu0 0.0
  %1934 = vmatmul.mubr.f32.gmra.mrb[0].mxu0 %v1651
  %v1935 = vpop.f32.mrb[0].mxu0
  %v1936 = vadd.f32 0.0, %v1935
  %v1937 = vpop.f32.mrb[0].mxu0
  %1938 = vmatprep.mubr.f32.mxu0 0.0
  %1939 = vmatmul.mubr.f32.gmra.mrb[0].mxu0 %v1654
  %v1940 = vpop.f32.mrb[0].mxu0
  %v1941 = vadd.f32 0.0, %v1940
  %v1942 = vpop.f32.mrb[0].mxu0
  %1943 = vmatprep.mubr.f32.mxu0 0.0
  %1944 = vmatmul.mubr.f32.gmra.mrb[0].mxu0 %v1657
  %v1945 = vpop.f32.mrb[0].mxu0
  %v1946 = vadd.f32 0.0, %v1945
  %v1947 = vpop.f32.mrb[0].mxu0
  %1948 = vmatprep.mubr.f32.mxu0 0.0
  %1949 = vmatmul.mubr.f32.gmra.mrb[0].mxu0 %v1660
  %v1950 = vpop.f32.mrb[0].mxu0
  %v1951 = vadd.f32 0.0, %v1950
  %v1952 = vpop.f32.mrb[0].mxu0
  %1953 = vmatprep.mubr.f32.mxu0 0.0
  %1954 = vmatmul.mubr.f32.gmra.mrb[0].mxu0 %v1663
  %v1955 = vpop.f32.mrb[0].mxu0
  %v1956 = vadd.f32 0.0, %v1955
  %v1957 = vpop.f32.mrb[0].mxu0
  %1958 = vmatprep.mubr.f32.mxu0 0.0
  %1959 = vmatmul.mubr.f32.gmra.mrb[0].mxu0 %v1666
  %v1960 = vpop.f32.mrb[0].mxu0
  %v1961 = vadd.f32 0.0, %v1960
  %v1962 = vpop.f32.mrb[0].mxu0
  %1963 = vmatprep.mubr.f32.mxu0 0.0
  %1964 = vmatmul.mubr.f32.gmra.mrb[0].mxu0 %v1669
  %v1965 = vpop.f32.mrb[0].mxu0
  %v1966 = vadd.f32 0.0, %v1965
  %v1967 = vpop.f32.mrb[0].mxu0
  %1968 = vmatprep.mubr.f32.mxu0 0.0
  %1969 = vmatmul.mubr.f32.gmra.mrb[0].mxu0 %v1672
  %v1970 = vpop.f32.mrb[0].mxu0
  %v1971 = vadd.f32 0.0, %v1970
  %v1972 = vpop.f32.mrb[0].mxu0
  %1973 = vmatprep.mubr.f32.mxu0 0.0
  %1974 = vmatmul.mubr.f32.gmra.mrb[0].mxu0 %v1675
  %v1975 = vpop.f32.mrb[0].mxu0
  %v1976 = vadd.f32 0.0, %v1975
  %v1977 = vpop.f32.mrb[0].mxu0
  %1978 = vmatprep.mubr.f32.mxu0 0.0
  %1979 = vmatmul.mubr.f32.gmra.mrb[0].mxu0 %v1678
  %v1980 = vpop.f32.mrb[0].mxu0
  %v1981 = vadd.f32 0.0, %v1980
  %v1982 = vpop.f32.mrb[0].mxu0
  %1983 = vmatprep.mubr.f32.mxu0 0.0
  %1984 = vmatmul.mubr.f32.gmra.mrb[0].mxu0 %v1681
  %v1985 = vpop.f32.mrb[0].mxu0
  %v1986 = vadd.f32 0.0, %v1985
  %v1987 = vpop.f32.mrb[0].mxu0
  %1988 = vmatprep.mubr.f32.mxu0 0.0
  %1989 = vmatmul.mubr.f32.gmra.mrb[0].mxu0 %v1684
  %v1990 = vpop.f32.mrb[0].mxu0
  %v1991 = vadd.f32 0.0, %v1990
  %v1992 = vpop.f32.mrb[0].mxu0
  %1993 = vmatprep.mubr.f32.mxu0 0.0
  %1994 = vmatmul.mubr.f32.gmra.mrb[0].mxu0 %v1687
  %v1995 = vpop.f32.mrb[0].mxu0
  %v1996 = vadd.f32 0.0, %v1995
  %v1997 = vpop.f32.mrb[0].mxu0
  %1998 = vmatprep.mubr.f32.mxu0 0.0
  %1999 = vmatmul.mubr.f32.gmra.mrb[0].mxu0 %v1690
  %v2000 = vpop.f32.mrb[0].mxu0
  %v2001 = vadd.f32 0.0, %v2000
  %v2002 = vpop.f32.mrb[0].mxu0
  %2003 = vmatprep.mubr.f32.mxu0 0.0
  %2004 = vmatmul.mubr.f32.gmra.mrb[0].mxu0 %v1693
  %v2005 = vpop.f32.mrb[0].mxu0
  %v2006 = vadd.f32 0.0, %v2005
  %v2007 = vpop.f32.mrb[0].mxu0
  %2008 = vmatprep.mubr.f32.mxu0 0.0
  %2009 = vmatmul.mubr.f32.gmra.mrb[0].mxu0 %v1696
  %v2010 = vpop.f32.mrb[0].mxu0
  %v2011 = vadd.f32 0.0, %v2010
  %v2012 = vpop.f32.mrb[0].mxu0
  %2013 = vmatprep.mubr.f32.mxu0 0.0
  %2014 = vmatmul.mubr.f32.gmra.mrb[0].mxu0 %v1699
  %v2015 = vpop.f32.mrb[0].mxu0
  %v2016 = vadd.f32 0.0, %v2015
  %v2017 = vpop.f32.mrb[0].mxu0
  %2018 = vmatprep.mubr.f32.mxu0 0.0
  %2019 = vmatmul.mubr.f32.gmra.mrb[0].mxu0 %v1702
  %v2020 = vpop.f32.mrb[0].mxu0
  %v2021 = vadd.f32 0.0, %v2020
  %v2022 = vpop.f32.mrb[0].mxu0
  %2023 = vmatprep.mubr.f32.mxu0 0.0
  %2024 = vmatmul.mubr.f32.gmra.mrb[0].mxu0 %v1705
  %v2025 = vpop.f32.mrb[0].mxu0
  %v2026 = vadd.f32 0.0, %v2025
  %v2027 = vpop.f32.mrb[0].mxu0
  %2028 = vmatprep.mubr.f32.mxu0 0.0
  %2029 = vmatmul.mubr.f32.gmra.mrb[0].mxu0 %v1708
  %v2030 = vpop.f32.mrb[0].mxu0
  %v2031 = vadd.f32 0.0, %v2030
  %v2032 = vpop.f32.mrb[0].mxu0
  %2033 = vmatprep.mubr.f32.mxu0 0.0
  %2034 = vmatmul.mubr.f32.gmra.mrb[0].mxu0 %v1711
  %v2035 = vpop.f32.mrb[0].mxu0
  %v2036 = vadd.f32 0.0, %v2035
  %v2037 = vpop.f32.mrb[0].mxu0
  %2038 = vmatprep.mubr.f32.mxu0 0.0
  %2039 = vmatmul.mubr.f32.gmra.mrb[0].mxu0 %v1714
  %v2040 = vpop.f32.mrb[0].mxu0
  %v2041 = vadd.f32 0.0, %v2040
  %v2042 = vpop.f32.mrb[0].mxu0
  %2043 = vmatprep.mubr.f32.mxu0 0.0
  %2044 = vmatmul.mubr.f32.gmra.mrb[0].mxu0 %v1717
  %v2045 = vpop.f32.mrb[0].mxu0
  %v2046 = vadd.f32 0.0, %v2045
  %v2047 = vpop.f32.mrb[0].mxu0
  %2048 = vmatprep.mubr.f32.mxu0 0.0
  %2049 = vmatmul.mubr.f32.gmra.mrb[0].mxu0 %v1720
  %v2050 = vpop.f32.mrb[0].mxu0
  %v2051 = vadd.f32 0.0, %v2050
  %v2052 = vpop.f32.mrb[0].mxu0
  %2053 = vmatprep.mubr.f32.mxu0 0.0
  %2054 = vmatmul.mubr.f32.gmra.mrb[0].mxu0 %v1723
  %v2055 = vpop.f32.mrb[0].mxu0
  %v2056 = vadd.f32 0.0, %v2055
  %v2057 = vpop.f32.mrb[0].mxu0
  %2058 = vmatprep.mubr.f32.mxu0 0.0
  %2059 = vmatmul.mubr.f32.gmra.mrb[0].mxu0 %v1726
  %v2060 = vpop.f32.mrb[0].mxu0
  %v2061 = vadd.f32 0.0, %v2060
  %v2062 = vpop.f32.mrb[0].mxu0
  %2063 = vmatprep.mubr.f32.mxu0 0.0
  %2064 = vmatmul.mubr.f32.gmra.mrb[0].mxu0 %v1729
  %v2065 = vpop.f32.mrb[0].mxu0
  %v2066 = vadd.f32 0.0, %v2065
  %v2067 = vpop.f32.mrb[0].mxu0
  %2068 = vmatprep.mubr.f32.mxu0 0.0
  %2069 = vmatmul.mubr.f32.gmra.mrb[0].mxu0 %v1732
  %v2070 = vpop.f32.mrb[0].mxu0
  %v2071 = vadd.f32 0.0, %v2070
  %v2072 = vpop.f32.mrb[0].mxu0
  %2073 = vmatprep.mubr.f32.mxu0 0.0
  %2074 = vmatmul.mubr.f32.gmra.mrb[0].mxu0 %v1735
  %v2075 = vpop.f32.mrb[0].mxu0
  %v2076 = vadd.f32 0.0, %v2075
  %v2077 = vpop.f32.mrb[0].mxu0
  %2078 = vmatprep.mubr.f32.mxu0 0.0
  %2079 = vmatmul.mubr.f32.gmra.mrb[0].mxu0 %v1738
  %v2080 = vpop.f32.mrb[0].mxu0
  %v2081 = vadd.f32 0.0, %v2080
  %v2082 = vpop.f32.mrb[0].mxu0
  %2083 = vmatprep.mubr.f32.mxu0 0.0
  %2084 = vmatmul.mubr.f32.gmra.mrb[0].mxu0 %v1741
  %v2085 = vpop.f32.mrb[0].mxu0
  %v2086 = vadd.f32 0.0, %v2085
  %v2087 = vpop.f32.mrb[0].mxu0
  %2088 = vmatprep.mubr.f32.mxu0 0.0
  %2089 = vmatmul.mubr.f32.gmra.mrb[0].mxu0 %v1744
  %v2090 = vpop.f32.mrb[0].mxu0
  %v2091 = vadd.f32 0.0, %v2090
  %v2092 = vpop.f32.mrb[0].mxu0
  %2093 = vmatprep.mubr.f32.mxu0 0.0
  %2094 = vmatmul.mubr.f32.gmra.mrb[0].mxu0 %v1747
  %v2095 = vpop.f32.mrb[0].mxu0
  %v2096 = vadd.f32 0.0, %v2095
  %v2097 = vpop.f32.mrb[0].mxu0
  %2098 = vmatprep.mubr.f32.mxu0 0.0
  %2099 = vmatmul.mubr.f32.gmra.mrb[0].mxu0 %v1750
  %v2100 = vpop.f32.mrb[0].mxu0
  %v2101 = vadd.f32 0.0, %v2100
  %v2102 = vpop.f32.mrb[0].mxu0
  %2103 = vmatprep.mubr.f32.mxu0 0.0
  %2104 = vmatmul.mubr.f32.gmra.mrb[0].mxu0 %v1753
  %v2105 = vpop.f32.mrb[0].mxu0
  %v2106 = vadd.f32 0.0, %v2105
  %v2107 = vpop.f32.mrb[0].mxu0
  %2108 = vmatprep.mubr.f32.mxu0 0.0
  %2109 = vmatmul.mubr.f32.gmra.mrb[0].mxu0 %v1756
  %v2110 = vpop.f32.mrb[0].mxu0
  %v2111 = vadd.f32 0.0, %v2110
  %v2112 = vpop.f32.mrb[0].mxu0
  %2113 = vmatprep.mubr.f32.mxu0 0.0
  %2114 = vmatmul.mubr.f32.gmra.mrb[0].mxu0 %v1759
  %v2115 = vpop.f32.mrb[0].mxu0
  %v2116 = vadd.f32 0.0, %v2115
  %v2117 = vpop.f32.mrb[0].mxu0
  %2118 = vmatprep.mubr.f32.mxu0 0.0
  %2119 = vmatmul.mubr.f32.gmra.mrb[0].mxu0 %v1762
  %v2120 = vpop.f32.mrb[0].mxu0
  %v2121 = vadd.f32 0.0, %v2120
  %v2122 = vpop.f32.mrb[0].mxu0
  %2123 = vmatprep.mubr.f32.mxu0 0.0
  %2124 = vmatmul.mubr.f32.gmra.mrb[0].mxu0 %v1765
  %v2125 = vpop.f32.mrb[0].mxu0
  %v2126 = vadd.f32 0.0, %v2125
  %v2127 = vpop.f32.mrb[0].mxu0
  %2128 = vmatprep.mubr.f32.mxu0 0.0
  %2129 = vmatmul.mubr.f32.gmra.mrb[0].mxu0 %v1768
  %v2130 = vpop.f32.mrb[0].mxu0
  %v2131 = vadd.f32 0.0, %v2130
  %v2132 = vpop.f32.mrb[0].mxu0
  %2133 = vmatprep.mubr.f32.mxu0 0.0
  %2134 = vmatmul.mubr.f32.gmra.mrb[0].mxu0 %v1771
  %v2135 = vpop.f32.mrb[0].mxu0
  %v2136 = vadd.f32 0.0, %v2135
  %v2137 = vpop.f32.mrb[0].mxu0
  %2138 = vmatprep.mubr.f32.mxu0 0.0
  %2139 = vmatmul.mubr.f32.gmra.mrb[0].mxu0 %v1774
  %v2140 = vpop.f32.mrb[0].mxu0
  %v2141 = vadd.f32 0.0, %v2140
  %v2142 = vpop.f32.mrb[0].mxu0
  %2143 = vmatprep.mubr.f32.mxu0 0.0
  %2144 = vmatmul.mubr.f32.gmra.mrb[0].mxu0 %v1777
  %v2145 = vpop.f32.mrb[0].mxu0
  %v2146 = vadd.f32 0.0, %v2145
  %v2147 = vpop.f32.mrb[0].mxu0
  %2148 = vmatprep.mubr.f32.mxu0 0.0
  %2149 = vmatmul.mubr.f32.gmra.mrb[0].mxu0 %v1780
  %v2150 = vpop.f32.mrb[0].mxu0
  %v2151 = vadd.f32 0.0, %v2150
  %v2152 = vpop.f32.mrb[0].mxu0
  %2153 = vmatprep.mubr.f32.mxu0 0.0
  %2154 = vmatmul.mubr.f32.gmra.mrb[0].mxu0 %v1783
  %v2155 = vpop.f32.mrb[0].mxu0
  %v2156 = vadd.f32 0.0, %v2155
  %v2157 = vpop.f32.mrb[0].mxu0
  %2158 = vmatprep.mubr.f32.mxu0 0.0
  %2159 = vmatmul.mubr.f32.gmra.mrb[0].mxu0 %v1786
  %v2160 = vpop.f32.mrb[0].mxu0
  %v2161 = vadd.f32 0.0, %v2160
  %v2162 = vpop.f32.mrb[0].mxu0
  %2163 = vmatprep.mubr.f32.mxu0 0.0
  %2164 = vmatmul.mubr.f32.gmra.mrb[0].mxu0 %v1789
  %v2165 = vpop.f32.mrb[0].mxu0
  %v2166 = vadd.f32 0.0, %v2165
  %v2167 = vpop.f32.mrb[0].mxu0
  %2168 = vmatprep.mubr.f32.mxu0 0.0
  %2169 = vmatmul.mubr.f32.gmra.mrb[0].mxu0 %v1792
  %v2170 = vpop.f32.mrb[0].mxu0
  %v2171 = vadd.f32 0.0, %v2170
  %v2172 = vpop.f32.mrb[0].mxu0
  %2173 = vmatprep.mubr.f32.mxu0 0.0
  %2174 = vmatmul.mubr.f32.gmra.mrb[0].mxu0 %v1795
  %v2175 = vpop.f32.mrb[0].mxu0
  %v2176 = vadd.f32 0.0, %v2175
  %v2177 = vpop.f32.mrb[0].mxu0
  %2178 = vmatprep.mubr.f32.mxu0 0.0
  %2179 = vmatmul.mubr.f32.gmra.mrb[0].mxu0 %v1798
  %v2180 = vpop.f32.mrb[0].mxu0
  %v2181 = vadd.f32 0.0, %v2180
  %v2182 = vpop.f32.mrb[0].mxu0
  %2183 = vmatprep.mubr.f32.mxu0 0.0
  %2184 = vmatmul.mubr.f32.gmra.mrb[0].mxu0 %v1801
  %v2185 = vpop.f32.mrb[0].mxu0
  %v2186 = vadd.f32 0.0, %v2185
  %v2187 = vpop.f32.mrb[0].mxu0
  %2188 = vmatprep.mubr.f32.mxu0 0.0
  %2189 = vmatmul.mubr.f32.gmra.mrb[0].mxu0 %v1804
  %v2190 = vpop.f32.mrb[0].mxu0
  %v2191 = vadd.f32 0.0, %v2190
  %v2192 = vpop.f32.mrb[0].mxu0
  %2193 = vdwg.mxu0
  %v2194 = vadd.f32 %v1232, %v1876
  %v2195 = vadd.f32 %v1237, %v1881
  %v2196 = vadd.f32 %v1242, %v1886
  %v2197 = vadd.f32 %v1247, %v1891
  %v2198 = vadd.f32 %v1252, %v1896
  %v2199 = vadd.f32 %v1257, %v1901
  %v2200 = vadd.f32 %v1262, %v1906
  %v2201 = vadd.f32 %v1267, %v1911
  %v2202 = vadd.f32 %v1272, %v1916
  %v2203 = vadd.f32 %v1277, %v1921
  %v2204 = vadd.f32 %v1282, %v1926
  %v2205 = vadd.f32 %v1287, %v1931
  %v2206 = vadd.f32 %v1292, %v1936
  %v2207 = vadd.f32 %v1297, %v1941
  %v2208 = vadd.f32 %v1302, %v1946
  %v2209 = vadd.f32 %v1307, %v1951
  %v2210 = vadd.f32 %v1312, %v1956
  %v2211 = vadd.f32 %v1317, %v1961
  %v2212 = vadd.f32 %v1322, %v1966
  %v2213 = vadd.f32 %v1327, %v1971
  %v2214 = vadd.f32 %v1332, %v1976
  %v2215 = vadd.f32 %v1337, %v1981
  %v2216 = vadd.f32 %v1342, %v1986
  %v2217 = vadd.f32 %v1347, %v1991
  %v2218 = vadd.f32 %v1352, %v1996
  %v2219 = vadd.f32 %v1357, %v2001
  %v2220 = vadd.f32 %v1362, %v2006
  %v2221 = vadd.f32 %v1367, %v2011
  %v2222 = vadd.f32 %v1372, %v2016
  %v2223 = vadd.f32 %v1377, %v2021
  %v2224 = vadd.f32 %v1382, %v2026
  %v2225 = vadd.f32 %v1387, %v2031
  %v2226 = vadd.f32 %v1392, %v2036
  %v2227 = vadd.f32 %v1397, %v2041
  %v2228 = vadd.f32 %v1402, %v2046
  %v2229 = vadd.f32 %v1407, %v2051
  %v2230 = vadd.f32 %v1412, %v2056
  %v2231 = vadd.f32 %v1417, %v2061
  %v2232 = vadd.f32 %v1422, %v2066
  %v2233 = vadd.f32 %v1427, %v2071
  %v2234 = vadd.f32 %v1432, %v2076
  %v2235 = vadd.f32 %v1437, %v2081
  %v2236 = vadd.f32 %v1442, %v2086
  %v2237 = vadd.f32 %v1447, %v2091
  %v2238 = vadd.f32 %v1452, %v2096
  %v2239 = vadd.f32 %v1457, %v2101
  %v2240 = vadd.f32 %v1462, %v2106
  %v2241 = vadd.f32 %v1467, %v2111
  %v2242 = vadd.f32 %v1472, %v2116
  %v2243 = vadd.f32 %v1477, %v2121
  %v2244 = vadd.f32 %v1482, %v2126
  %v2245 = vadd.f32 %v1487, %v2131
  %v2246 = vadd.f32 %v1492, %v2136
  %v2247 = vadd.f32 %v1497, %v2141
  %v2248 = vadd.f32 %v1502, %v2146
  %v2249 = vadd.f32 %v1507, %v2151
  %v2250 = vadd.f32 %v1512, %v2156
  %v2251 = vadd.f32 %v1517, %v2161
  %v2252 = vadd.f32 %v1522, %v2166
  %v2253 = vadd.f32 %v1527, %v2171
  %v2254 = vadd.f32 %v1532, %v2176
  %v2255 = vadd.f32 %v1537, %v2181
  %v2256 = vadd.f32 %v1542, %v2186
  %v2257 = vadd.f32 %v1547, %v2191
  %v2258 = vld [vmem:[%s196] sm:$0xff]
  %v2259 = vld [vmem:[%s196 + $0x8] sm:$0xff]
  %v2260 = vld [vmem:[%s196 + $0x18] sm:$0xff]
  %v2261 = vld [vmem:[%s196 + $0x20] sm:$0xff]
  %v2262 = vld [vmem:[%s196 + $0x30] sm:$0xff]
  %v2263 = vld [vmem:[%s196 + $0x38] sm:$0xff]
  %v2264 = vld [vmem:[%s196 + $0x48] sm:$0xff]
  %v2265 = vld [vmem:[%s196 + $0x50] sm:$0xff]
  %v2266 = vld [vmem:[%s196 + $0x60] sm:$0xff]
  %v2267 = vld [vmem:[%s196 + $0x68] sm:$0xff]
  %v2268 = vld [vmem:[%s196 + $0x78] sm:$0xff]
  %v2269 = vld [vmem:[%s196 + $0x80] sm:$0xff]
  %v2270 = vld [vmem:[%s196 + $0x90] sm:$0xff]
  %v2271 = vld [vmem:[%s196 + $0x98] sm:$0xff]
  %v2272 = vld [vmem:[%s196 + $0xa8] sm:$0xff]
  %v2273 = vld [vmem:[%s196 + $0xb0] sm:$0xff]
  %v2274 = vld [vmem:[%s196 + $0xc0] sm:$0xff]
  %v2275 = vld [vmem:[%s196 + $0xc8] sm:$0xff]
  %v2276 = vld [vmem:[%s196 + $0xd8] sm:$0xff]
  %v2277 = vld [vmem:[%s196 + $0xe0] sm:$0xff]
  %v2278 = vld [vmem:[%s196 + $0xf0] sm:$0xff]
  %v2279 = vld [vmem:[%s196 + $0xf8] sm:$0xff]
  %v2280 = vld [vmem:[%s196 + $0x108] sm:$0xff]
  %v2281 = vld [vmem:[%s196 + $0x110] sm:$0xff]
  %v2282 = vld [vmem:[%s196 + $0x120] sm:$0xff]
  %v2283 = vld [vmem:[%s196 + $0x128] sm:$0xff]
  %v2284 = vld [vmem:[%s196 + $0x138] sm:$0xff]
  %v2285 = vld [vmem:[%s196 + $0x140] sm:$0xff]
  %v2286 = vld [vmem:[%s196 + $0x150] sm:$0xff]
  %v2287 = vld [vmem:[%s196 + $0x158] sm:$0xff]
  %v2288 = vld [vmem:[%s196 + $0x168] sm:$0xff]
  %v2289 = vld [vmem:[%s196 + $0x170] sm:$0xff]
  %v2290 = vld [vmem:[%s196 + $0x1b0] sm:$0xff]
  %v2291 = vld [vmem:[%s196 + $0x1b8] sm:$0xff]
  %v2292 = vld [vmem:[%s196 + $0x1c8] sm:$0xff]
  %v2293 = vld [vmem:[%s196 + $0x1d0] sm:$0xff]
  %v2294 = vld [vmem:[%s196 + $0x1e0] sm:$0xff]
  %v2295 = vld [vmem:[%s196 + $0x1e8] sm:$0xff]
  %v2296 = vld [vmem:[%s196 + $0x1f8] sm:$0xff]
  %v2297 = vld [vmem:[%s196 + $0x200] sm:$0xff]
  %v2298 = vld [vmem:[%s196 + $0x210] sm:$0xff]
  %v2299 = vld [vmem:[%s196 + $0x218] sm:$0xff]
  %v2300 = vld [vmem:[%s196 + $0x228] sm:$0xff]
  %v2301 = vld [vmem:[%s196 + $0x230] sm:$0xff]
  %v2302 = vld [vmem:[%s196 + $0x240] sm:$0xff]
  %v2303 = vld [vmem:[%s196 + $0x248] sm:$0xff]
  %v2304 = vld [vmem:[%s196 + $0x258] sm:$0xff]
  %v2305 = vld [vmem:[%s196 + $0x260] sm:$0xff]
  %v2306 = vld [vmem:[%s196 + $0x270] sm:$0xff]
  %v2307 = vld [vmem:[%s196 + $0x278] sm:$0xff]
  %v2308 = vld [vmem:[%s196 + $0x288] sm:$0xff]
  %v2309 = vld [vmem:[%s196 + $0x290] sm:$0xff]
  %v2310 = vld [vmem:[%s196 + $0x2a0] sm:$0xff]
  %v2311 = vld [vmem:[%s196 + $0x2a8] sm:$0xff]
  %v2312 = vld [vmem:[%s196 + $0x2b8] sm:$0xff]
  %v2313 = vld [vmem:[%s196 + $0x2c0] sm:$0xff]
  %v2314 = vld [vmem:[%s196 + $0x2d0] sm:$0xff]
  %v2315 = vld [vmem:[%s196 + $0x2d8] sm:$0xff]
  %v2316 = vld [vmem:[%s196 + $0x2e8] sm:$0xff]
  %v2317 = vld [vmem:[%s196 + $0x2f0] sm:$0xff]
  %v2318 = vld [vmem:[%s196 + $0x300] sm:$0xff]
  %v2319 = vld [vmem:[%s196 + $0x308] sm:$0xff]
  %v2320 = vld [vmem:[%s196 + $0x318] sm:$0xff]
  %v2321 = vld [vmem:[%s196 + $0x320] sm:$0xff]
  %v2323 = vsel %vm44, %v2258, 0
  %v2326 = vsel %vm44, %v2259, 0
  %v2329 = vsel %vm44, %v2260, 0
  %v2332 = vsel %vm44, %v2261, 0
  %v2335 = vsel %vm44, %v2262, 0
  %v2338 = vsel %vm44, %v2263, 0
  %v2341 = vsel %vm44, %v2264, 0
  %v2344 = vsel %vm44, %v2265, 0
  %v2347 = vsel %vm44, %v2266, 0
  %v2350 = vsel %vm44, %v2267, 0
  %v2353 = vsel %vm44, %v2268, 0
  %v2356 = vsel %vm44, %v2269, 0
  %v2359 = vsel %vm44, %v2270, 0
  %v2362 = vsel %vm44, %v2271, 0
  %v2365 = vsel %vm44, %v2272, 0
  %v2368 = vsel %vm44, %v2273, 0
  %v2371 = vsel %vm44, %v2274, 0
  %v2374 = vsel %vm44, %v2275, 0
  %v2377 = vsel %vm44, %v2276, 0
  %v2380 = vsel %vm44, %v2277, 0
  %v2383 = vsel %vm44, %v2278, 0
  %v2386 = vsel %vm44, %v2279, 0
  %v2389 = vsel %vm44, %v2280, 0
  %v2392 = vsel %vm44, %v2281, 0
  %v2395 = vsel %vm44, %v2282, 0
  %v2398 = vsel %vm44, %v2283, 0
  %v2401 = vsel %vm44, %v2284, 0
  %v2404 = vsel %vm44, %v2285, 0
  %v2407 = vsel %vm44, %v2286, 0
  %v2410 = vsel %vm44, %v2287, 0
  %v2413 = vsel %vm44, %v2288, 0
  %v2416 = vsel %vm44, %v2289, 0
  %v2419 = vsel %vm44, %v2290, 0
  %v2422 = vsel %vm44, %v2291, 0
  %v2425 = vsel %vm44, %v2292, 0
  %v2428 = vsel %vm44, %v2293, 0
  %v2431 = vsel %vm44, %v2294, 0
  %v2434 = vsel %vm44, %v2295, 0
  %v2437 = vsel %vm44, %v2296, 0
  %v2440 = vsel %vm44, %v2297, 0
  %v2443 = vsel %vm44, %v2298, 0
  %v2446 = vsel %vm44, %v2299, 0
  %v2449 = vsel %vm44, %v2300, 0
  %v2452 = vsel %vm44, %v2301, 0
  %v2455 = vsel %vm44, %v2302, 0
  %v2458 = vsel %vm44, %v2303, 0
  %v2461 = vsel %vm44, %v2304, 0
  %v2464 = vsel %vm44, %v2305, 0
  %v2467 = vsel %vm44, %v2306, 0
  %v2470 = vsel %vm44, %v2307, 0
  %v2473 = vsel %vm44, %v2308, 0
  %v2476 = vsel %vm44, %v2309, 0
  %v2479 = vsel %vm44, %v2310, 0
  %v2482 = vsel %vm44, %v2311, 0
  %v2485 = vsel %vm44, %v2312, 0
  %v2488 = vsel %vm44, %v2313, 0
  %v2491 = vsel %vm44, %v2314, 0
  %v2494 = vsel %vm44, %v2315, 0
  %v2497 = vsel %vm44, %v2316, 0
  %v2500 = vsel %vm44, %v2317, 0
  %v2503 = vsel %vm44, %v2318, 0
  %v2506 = vsel %vm44, %v2319, 0
  %v2509 = vsel %vm44, %v2320, 0
  %v2512 = vsel %vm44, %v2321, 0
  %v2515 = vsel %vm581, %v29, 0
  %2517 = vmatprep.subr.mxu0 0.0
  %2518 = vmatpush1.msra.mxu0 %v2515
  %2519 = vmatprep.subr.mxu0 0.0
  %2520 = vmatpush1.msra.mxu0 0.0
  %2521 = vmatprep.subr.mxu0 0.0
  %2522 = vmatpush1.msra.mxu0 0.0
  %2523 = vmatprep.subr.mxu0 0.0
  %2524 = vmatpush1.msra.mxu0 0.0
  %2525 = vmatprep.subr.mxu0 0.0
  %2526 = vmatpush1.msra.mxu0 0.0
  %2527 = vmatprep.subr.mxu0 0.0
  %2528 = vmatpush1.msra.mxu0 0.0
  %2529 = vmatprep.subr.mxu0 0.0
  %2530 = vmatpush1.msra.mxu0 0.0
  %2531 = vmatprep.subr.mxu0 0.0
  %2532 = vmatpush1.msra.mxu0 0.0
  %2533 = vmatprep.subr.mxu0 0.0
  %2534 = vmatpush1.msra.mxu0 0.0
  %2535 = vmatprep.subr.mxu0 0.0
  %2536 = vmatpush1.msra.mxu0 0.0
  %2537 = vmatprep.subr.mxu0 0.0
  %2538 = vmatpush1.msra.mxu0 0.0
  %2539 = vmatprep.subr.mxu0 0.0
  %2540 = vmatpush1.msra.mxu0 0.0
  %2541 = vmatprep.subr.mxu0 0.0
  %2542 = vmatpush1.msra.mxu0 0.0
  %2543 = vmatprep.subr.mxu0 0.0
  %2544 = vmatpush1.msra.mxu0 0.0
  %2545 = vmatprep.subr.mxu0 0.0
  %2546 = vmatpush1.msra.mxu0 0.0
  %2547 = vmatprep.subr.mxu0 0.0
  %2548 = vmatpush1.msra.mxu0 0.0
  %2549 = vmatprep.subr.mxu0 0.0
  %2550 = vmatpush1.msra.mxu0 0.0
  %2551 = vmatprep.subr.mxu0 0.0
  %2552 = vmatpush1.msra.mxu0 0.0
  %2553 = vmatprep.subr.mxu0 0.0
  %2554 = vmatpush1.msra.mxu0 0.0
  %2555 = vmatprep.subr.mxu0 0.0
  %2556 = vmatpush1.msra.mxu0 0.0
  %2557 = vmatprep.subr.mxu0 0.0
  %2558 = vmatpush1.msra.mxu0 0.0
  %2559 = vmatprep.subr.mxu0 0.0
  %2560 = vmatpush1.msra.mxu0 0.0
  %2561 = vmatprep.subr.mxu0 0.0
  %2562 = vmatpush1.msra.mxu0 0.0
  %2563 = vmatprep.subr.mxu0 0.0
  %2564 = vmatpush1.msra.mxu0 0.0
  %2565 = vmatprep.subr.mxu0 0.0
  %2566 = vmatpush1.msra.mxu0 0.0
  %2567 = vmatprep.subr.mxu0 0.0
  %2568 = vmatpush1.msra.mxu0 0.0
  %2569 = vmatprep.subr.mxu0 0.0
  %2570 = vmatpush1.msra.mxu0 0.0
  %2571 = vmatprep.subr.mxu0 0.0
  %2572 = vmatpush1.msra.mxu0 0.0
  %2573 = vmatprep.subr.mxu0 0.0
  %2574 = vmatpush1.msra.mxu0 0.0
  %2575 = vmatprep.subr.mxu0 0.0
  %2576 = vmatpush1.msra.mxu0 0.0
  %2577 = vmatprep.subr.mxu0 0.0
  %2578 = vmatpush1.msra.mxu0 0.0
  %2579 = vmatprep.subr.mxu0 0.0
  %2580 = vmatpush1.msra.mxu0 0.0
  %2581 = vmatprep.mubr.f32.mxu0 0.0
  %2582 = vmatmul.mubr.f32.gmra.mrb[0].mxu0 %v2323
  %v2583 = vpop.f32.mrb[0].mxu0
  %v2584 = vadd.f32 0.0, %v2583
  %v2585 = vpop.f32.mrb[0].mxu0
  %2586 = vmatprep.mubr.f32.mxu0 0.0
  %2587 = vmatmul.mubr.f32.gmra.mrb[0].mxu0 %v2326
  %v2588 = vpop.f32.mrb[0].mxu0
  %v2589 = vadd.f32 0.0, %v2588
  %v2590 = vpop.f32.mrb[0].mxu0
  %2591 = vmatprep.mubr.f32.mxu0 0.0
  %2592 = vmatmul.mubr.f32.gmra.mrb[0].mxu0 %v2329
  %v2593 = vpop.f32.mrb[0].mxu0
  %v2594 = vadd.f32 0.0, %v2593
  %v2595 = vpop.f32.mrb[0].mxu0
  %2596 = vmatprep.mubr.f32.mxu0 0.0
  %2597 = vmatmul.mubr.f32.gmra.mrb[0].mxu0 %v2332
  %v2598 = vpop.f32.mrb[0].mxu0
  %v2599 = vadd.f32 0.0, %v2598
  %v2600 = vpop.f32.mrb[0].mxu0
  %2601 = vmatprep.mubr.f32.mxu0 0.0
  %2602 = vmatmul.mubr.f32.gmra.mrb[0].mxu0 %v2335
  %v2603 = vpop.f32.mrb[0].mxu0
  %v2604 = vadd.f32 0.0, %v2603
  %v2605 = vpop.f32.mrb[0].mxu0
  %2606 = vmatprep.mubr.f32.mxu0 0.0
  %2607 = vmatmul.mubr.f32.gmra.mrb[0].mxu0 %v2338
  %v2608 = vpop.f32.mrb[0].mxu0
  %v2609 = vadd.f32 0.0, %v2608
  %v2610 = vpop.f32.mrb[0].mxu0
  %2611 = vmatprep.mubr.f32.mxu0 0.0
  %2612 = vmatmul.mubr.f32.gmra.mrb[0].mxu0 %v2341
  %v2613 = vpop.f32.mrb[0].mxu0
  %v2614 = vadd.f32 0.0, %v2613
  %v2615 = vpop.f32.mrb[0].mxu0
  %2616 = vmatprep.mubr.f32.mxu0 0.0
  %2617 = vmatmul.mubr.f32.gmra.mrb[0].mxu0 %v2344
  %v2618 = vpop.f32.mrb[0].mxu0
  %v2619 = vadd.f32 0.0, %v2618
  %v2620 = vpop.f32.mrb[0].mxu0
  %2621 = vmatprep.mubr.f32.mxu0 0.0
  %2622 = vmatmul.mubr.f32.gmra.mrb[0].mxu0 %v2347
  %v2623 = vpop.f32.mrb[0].mxu0
  %v2624 = vadd.f32 0.0, %v2623
  %v2625 = vpop.f32.mrb[0].mxu0
  %2626 = vmatprep.mubr.f32.mxu0 0.0
  %2627 = vmatmul.mubr.f32.gmra.mrb[0].mxu0 %v2350
  %v2628 = vpop.f32.mrb[0].mxu0
  %v2629 = vadd.f32 0.0, %v2628
  %v2630 = vpop.f32.mrb[0].mxu0
  %2631 = vmatprep.mubr.f32.mxu0 0.0
  %2632 = vmatmul.mubr.f32.gmra.mrb[0].mxu0 %v2353
  %v2633 = vpop.f32.mrb[0].mxu0
  %v2634 = vadd.f32 0.0, %v2633
  %v2635 = vpop.f32.mrb[0].mxu0
  %2636 = vmatprep.mubr.f32.mxu0 0.0
  %2637 = vmatmul.mubr.f32.gmra.mrb[0].mxu0 %v2356
  %v2638 = vpop.f32.mrb[0].mxu0
  %v2639 = vadd.f32 0.0, %v2638
  %v2640 = vpop.f32.mrb[0].mxu0
  %2641 = vmatprep.mubr.f32.mxu0 0.0
  %2642 = vmatmul.mubr.f32.gmra.mrb[0].mxu0 %v2359
  %v2643 = vpop.f32.mrb[0].mxu0
  %v2644 = vadd.f32 0.0, %v2643
  %v2645 = vpop.f32.mrb[0].mxu0
  %2646 = vmatprep.mubr.f32.mxu0 0.0
  %2647 = vmatmul.mubr.f32.gmra.mrb[0].mxu0 %v2362
  %v2648 = vpop.f32.mrb[0].mxu0
  %v2649 = vadd.f32 0.0, %v2648
  %v2650 = vpop.f32.mrb[0].mxu0
  %2651 = vmatprep.mubr.f32.mxu0 0.0
  %2652 = vmatmul.mubr.f32.gmra.mrb[0].mxu0 %v2365
  %v2653 = vpop.f32.mrb[0].mxu0
  %v2654 = vadd.f32 0.0, %v2653
  %v2655 = vpop.f32.mrb[0].mxu0
  %2656 = vmatprep.mubr.f32.mxu0 0.0
  %2657 = vmatmul.mubr.f32.gmra.mrb[0].mxu0 %v2368
  %v2658 = vpop.f32.mrb[0].mxu0
  %v2659 = vadd.f32 0.0, %v2658
  %v2660 = vpop.f32.mrb[0].mxu0
  %2661 = vmatprep.mubr.f32.mxu0 0.0
  %2662 = vmatmul.mubr.f32.gmra.mrb[0].mxu0 %v2371
  %v2663 = vpop.f32.mrb[0].mxu0
  %v2664 = vadd.f32 0.0, %v2663
  %v2665 = vpop.f32.mrb[0].mxu0
  %2666 = vmatprep.mubr.f32.mxu0 0.0
  %2667 = vmatmul.mubr.f32.gmra.mrb[0].mxu0 %v2374
  %v2668 = vpop.f32.mrb[0].mxu0
  %v2669 = vadd.f32 0.0, %v2668
  %v2670 = vpop.f32.mrb[0].mxu0
  %2671 = vmatprep.mubr.f32.mxu0 0.0
  %2672 = vmatmul.mubr.f32.gmra.mrb[0].mxu0 %v2377
  %v2673 = vpop.f32.mrb[0].mxu0
  %v2674 = vadd.f32 0.0, %v2673
  %v2675 = vpop.f32.mrb[0].mxu0
  %2676 = vmatprep.mubr.f32.mxu0 0.0
  %2677 = vmatmul.mubr.f32.gmra.mrb[0].mxu0 %v2380
  %v2678 = vpop.f32.mrb[0].mxu0
  %v2679 = vadd.f32 0.0, %v2678
  %v2680 = vpop.f32.mrb[0].mxu0
  %2681 = vmatprep.mubr.f32.mxu0 0.0
  %2682 = vmatmul.mubr.f32.gmra.mrb[0].mxu0 %v2383
  %v2683 = vpop.f32.mrb[0].mxu0
  %v2684 = vadd.f32 0.0, %v2683
  %v2685 = vpop.f32.mrb[0].mxu0
  %2686 = vmatprep.mubr.f32.mxu0 0.0
  %2687 = vmatmul.mubr.f32.gmra.mrb[0].mxu0 %v2386
  %v2688 = vpop.f32.mrb[0].mxu0
  %v2689 = vadd.f32 0.0, %v2688
  %v2690 = vpop.f32.mrb[0].mxu0
  %2691 = vmatprep.mubr.f32.mxu0 0.0
  %2692 = vmatmul.mubr.f32.gmra.mrb[0].mxu0 %v2389
  %v2693 = vpop.f32.mrb[0].mxu0
  %v2694 = vadd.f32 0.0, %v2693
  %v2695 = vpop.f32.mrb[0].mxu0
  %2696 = vmatprep.mubr.f32.mxu0 0.0
  %2697 = vmatmul.mubr.f32.gmra.mrb[0].mxu0 %v2392
  %v2698 = vpop.f32.mrb[0].mxu0
  %v2699 = vadd.f32 0.0, %v2698
  %v2700 = vpop.f32.mrb[0].mxu0
  %2701 = vmatprep.mubr.f32.mxu0 0.0
  %2702 = vmatmul.mubr.f32.gmra.mrb[0].mxu0 %v2395
  %v2703 = vpop.f32.mrb[0].mxu0
  %v2704 = vadd.f32 0.0, %v2703
  %v2705 = vpop.f32.mrb[0].mxu0
  %2706 = vmatprep.mubr.f32.mxu0 0.0
  %2707 = vmatmul.mubr.f32.gmra.mrb[0].mxu0 %v2398
  %v2708 = vpop.f32.mrb[0].mxu0
  %v2709 = vadd.f32 0.0, %v2708
  %v2710 = vpop.f32.mrb[0].mxu0
  %2711 = vmatprep.mubr.f32.mxu0 0.0
  %2712 = vmatmul.mubr.f32.gmra.mrb[0].mxu0 %v2401
  %v2713 = vpop.f32.mrb[0].mxu0
  %v2714 = vadd.f32 0.0, %v2713
  %v2715 = vpop.f32.mrb[0].mxu0
  %2716 = vmatprep.mubr.f32.mxu0 0.0
  %2717 = vmatmul.mubr.f32.gmra.mrb[0].mxu0 %v2404
  %v2718 = vpop.f32.mrb[0].mxu0
  %v2719 = vadd.f32 0.0, %v2718
  %v2720 = vpop.f32.mrb[0].mxu0
  %2721 = vmatprep.mubr.f32.mxu0 0.0
  %2722 = vmatmul.mubr.f32.gmra.mrb[0].mxu0 %v2407
  %v2723 = vpop.f32.mrb[0].mxu0
  %v2724 = vadd.f32 0.0, %v2723
  %v2725 = vpop.f32.mrb[0].mxu0
  %2726 = vmatprep.mubr.f32.mxu0 0.0
  %2727 = vmatmul.mubr.f32.gmra.mrb[0].mxu0 %v2410
  %v2728 = vpop.f32.mrb[0].mxu0
  %v2729 = vadd.f32 0.0, %v2728
  %v2730 = vpop.f32.mrb[0].mxu0
  %2731 = vmatprep.mubr.f32.mxu0 0.0
  %2732 = vmatmul.mubr.f32.gmra.mrb[0].mxu0 %v2413
  %v2733 = vpop.f32.mrb[0].mxu0
  %v2734 = vadd.f32 0.0, %v2733
  %v2735 = vpop.f32.mrb[0].mxu0
  %2736 = vmatprep.mubr.f32.mxu0 0.0
  %2737 = vmatmul.mubr.f32.gmra.mrb[0].mxu0 %v2416
  %v2738 = vpop.f32.mrb[0].mxu0
  %v2739 = vadd.f32 0.0, %v2738
  %v2740 = vpop.f32.mrb[0].mxu0
  %2741 = vmatprep.mubr.f32.mxu0 0.0
  %2742 = vmatmul.mubr.f32.gmra.mrb[0].mxu0 %v2419
  %v2743 = vpop.f32.mrb[0].mxu0
  %v2744 = vadd.f32 0.0, %v2743
  %v2745 = vpop.f32.mrb[0].mxu0
  %2746 = vmatprep.mubr.f32.mxu0 0.0
  %2747 = vmatmul.mubr.f32.gmra.mrb[0].mxu0 %v2422
  %v2748 = vpop.f32.mrb[0].mxu0
  %v2749 = vadd.f32 0.0, %v2748
  %v2750 = vpop.f32.mrb[0].mxu0
  %2751 = vmatprep.mubr.f32.mxu0 0.0
  %2752 = vmatmul.mubr.f32.gmra.mrb[0].mxu0 %v2425
  %v2753 = vpop.f32.mrb[0].mxu0
  %v2754 = vadd.f32 0.0, %v2753
  %v2755 = vpop.f32.mrb[0].mxu0
  %2756 = vmatprep.mubr.f32.mxu0 0.0
  %2757 = vmatmul.mubr.f32.gmra.mrb[0].mxu0 %v2428
  %v2758 = vpop.f32.mrb[0].mxu0
  %v2759 = vadd.f32 0.0, %v2758
  %v2760 = vpop.f32.mrb[0].mxu0
  %2761 = vmatprep.mubr.f32.mxu0 0.0
  %2762 = vmatmul.mubr.f32.gmra.mrb[0].mxu0 %v2431
  %v2763 = vpop.f32.mrb[0].mxu0
  %v2764 = vadd.f32 0.0, %v2763
  %v2765 = vpop.f32.mrb[0].mxu0
  %2766 = vmatprep.mubr.f32.mxu0 0.0
  %2767 = vmatmul.mubr.f32.gmra.mrb[0].mxu0 %v2434
  %v2768 = vpop.f32.mrb[0].mxu0
  %v2769 = vadd.f32 0.0, %v2768
  %v2770 = vpop.f32.mrb[0].mxu0
  %2771 = vmatprep.mubr.f32.mxu0 0.0
  %2772 = vmatmul.mubr.f32.gmra.mrb[0].mxu0 %v2437
  %v2773 = vpop.f32.mrb[0].mxu0
  %v2774 = vadd.f32 0.0, %v2773
  %v2775 = vpop.f32.mrb[0].mxu0
  %2776 = vmatprep.mubr.f32.mxu0 0.0
  %2777 = vmatmul.mubr.f32.gmra.mrb[0].mxu0 %v2440
  %v2778 = vpop.f32.mrb[0].mxu0
  %v2779 = vadd.f32 0.0, %v2778
  %v2780 = vpop.f32.mrb[0].mxu0
  %2781 = vmatprep.mubr.f32.mxu0 0.0
  %2782 = vmatmul.mubr.f32.gmra.mrb[0].mxu0 %v2443
  %v2783 = vpop.f32.mrb[0].mxu0
  %v2784 = vadd.f32 0.0, %v2783
  %v2785 = vpop.f32.mrb[0].mxu0
  %2786 = vmatprep.mubr.f32.mxu0 0.0
  %2787 = vmatmul.mubr.f32.gmra.mrb[0].mxu0 %v2446
  %v2788 = vpop.f32.mrb[0].mxu0
  %v2789 = vadd.f32 0.0, %v2788
  %v2790 = vpop.f32.mrb[0].mxu0
  %2791 = vmatprep.mubr.f32.mxu0 0.0
  %2792 = vmatmul.mubr.f32.gmra.mrb[0].mxu0 %v2449
  %v2793 = vpop.f32.mrb[0].mxu0
  %v2794 = vadd.f32 0.0, %v2793
  %v2795 = vpop.f32.mrb[0].mxu0
  %2796 = vmatprep.mubr.f32.mxu0 0.0
  %2797 = vmatmul.mubr.f32.gmra.mrb[0].mxu0 %v2452
  %v2798 = vpop.f32.mrb[0].mxu0
  %v2799 = vadd.f32 0.0, %v2798
  %v2800 = vpop.f32.mrb[0].mxu0
  %2801 = vmatprep.mubr.f32.mxu0 0.0
  %2802 = vmatmul.mubr.f32.gmra.mrb[0].mxu0 %v2455
  %v2803 = vpop.f32.mrb[0].mxu0
  %v2804 = vadd.f32 0.0, %v2803
  %v2805 = vpop.f32.mrb[0].mxu0
  %2806 = vmatprep.mubr.f32.mxu0 0.0
  %2807 = vmatmul.mubr.f32.gmra.mrb[0].mxu0 %v2458
  %v2808 = vpop.f32.mrb[0].mxu0
  %v2809 = vadd.f32 0.0, %v2808
  %v2810 = vpop.f32.mrb[0].mxu0
  %2811 = vmatprep.mubr.f32.mxu0 0.0
  %2812 = vmatmul.mubr.f32.gmra.mrb[0].mxu0 %v2461
  %v2813 = vpop.f32.mrb[0].mxu0
  %v2814 = vadd.f32 0.0, %v2813
  %v2815 = vpop.f32.mrb[0].mxu0
  %2816 = vmatprep.mubr.f32.mxu0 0.0
  %2817 = vmatmul.mubr.f32.gmra.mrb[0].mxu0 %v2464
  %v2818 = vpop.f32.mrb[0].mxu0
  %v2819 = vadd.f32 0.0, %v2818
  %v2820 = vpop.f32.mrb[0].mxu0
  %2821 = vmatprep.mubr.f32.mxu0 0.0
  %2822 = vmatmul.mubr.f32.gmra.mrb[0].mxu0 %v2467
  %v2823 = vpop.f32.mrb[0].mxu0
  %v2824 = vadd.f32 0.0, %v2823
  %v2825 = vpop.f32.mrb[0].mxu0
  %2826 = vmatprep.mubr.f32.mxu0 0.0
  %2827 = vmatmul.mubr.f32.gmra.mrb[0].mxu0 %v2470
  %v2828 = vpop.f32.mrb[0].mxu0
  %v2829 = vadd.f32 0.0, %v2828
  %v2830 = vpop.f32.mrb[0].mxu0
  %2831 = vmatprep.mubr.f32.mxu0 0.0
  %2832 = vmatmul.mubr.f32.gmra.mrb[0].mxu0 %v2473
  %v2833 = vpop.f32.mrb[0].mxu0
  %v2834 = vadd.f32 0.0, %v2833
  %v2835 = vpop.f32.mrb[0].mxu0
  %2836 = vmatprep.mubr.f32.mxu0 0.0
  %2837 = vmatmul.mubr.f32.gmra.mrb[0].mxu0 %v2476
  %v2838 = vpop.f32.mrb[0].mxu0
  %v2839 = vadd.f32 0.0, %v2838
  %v2840 = vpop.f32.mrb[0].mxu0
  %2841 = vmatprep.mubr.f32.mxu0 0.0
  %2842 = vmatmul.mubr.f32.gmra.mrb[0].mxu0 %v2479
  %v2843 = vpop.f32.mrb[0].mxu0
  %v2844 = vadd.f32 0.0, %v2843
  %v2845 = vpop.f32.mrb[0].mxu0
  %2846 = vmatprep.mubr.f32.mxu0 0.0
  %2847 = vmatmul.mubr.f32.gmra.mrb[0].mxu0 %v2482
  %v2848 = vpop.f32.mrb[0].mxu0
  %v2849 = vadd.f32 0.0, %v2848
  %v2850 = vpop.f32.mrb[0].mxu0
  %2851 = vmatprep.mubr.f32.mxu0 0.0
  %2852 = vmatmul.mubr.f32.gmra.mrb[0].mxu0 %v2485
  %v2853 = vpop.f32.mrb[0].mxu0
  %v2854 = vadd.f32 0.0, %v2853
  %v2855 = vpop.f32.mrb[0].mxu0
  %2856 = vmatprep.mubr.f32.mxu0 0.0
  %2857 = vmatmul.mubr.f32.gmra.mrb[0].mxu0 %v2488
  %v2858 = vpop.f32.mrb[0].mxu0
  %v2859 = vadd.f32 0.0, %v2858
  %v2860 = vpop.f32.mrb[0].mxu0
  %2861 = vmatprep.mubr.f32.mxu0 0.0
  %2862 = vmatmul.mubr.f32.gmra.mrb[0].mxu0 %v2491
  %v2863 = vpop.f32.mrb[0].mxu0
  %v2864 = vadd.f32 0.0, %v2863
  %v2865 = vpop.f32.mrb[0].mxu0
  %2866 = vmatprep.mubr.f32.mxu0 0.0
  %2867 = vmatmul.mubr.f32.gmra.mrb[0].mxu0 %v2494
  %v2868 = vpop.f32.mrb[0].mxu0
  %v2869 = vadd.f32 0.0, %v2868
  %v2870 = vpop.f32.mrb[0].mxu0
  %2871 = vmatprep.mubr.f32.mxu0 0.0
  %2872 = vmatmul.mubr.f32.gmra.mrb[0].mxu0 %v2497
  %v2873 = vpop.f32.mrb[0].mxu0
  %v2874 = vadd.f32 0.0, %v2873
  %v2875 = vpop.f32.mrb[0].mxu0
  %2876 = vmatprep.mubr.f32.mxu0 0.0
  %2877 = vmatmul.mubr.f32.gmra.mrb[0].mxu0 %v2500
  %v2878 = vpop.f32.mrb[0].mxu0
  %v2879 = vadd.f32 0.0, %v2878
  %v2880 = vpop.f32.mrb[0].mxu0
  %2881 = vmatprep.mubr.f32.mxu0 0.0
  %2882 = vmatmul.mubr.f32.gmra.mrb[0].mxu0 %v2503
  %v2883 = vpop.f32.mrb[0].mxu0
  %v2884 = vadd.f32 0.0, %v2883
  %v2885 = vpop.f32.mrb[0].mxu0
  %2886 = vmatprep.mubr.f32.mxu0 0.0
  %2887 = vmatmul.mubr.f32.gmra.mrb[0].mxu0 %v2506
  %v2888 = vpop.f32.mrb[0].mxu0
  %v2889 = vadd.f32 0.0, %v2888
  %v2890 = vpop.f32.mrb[0].mxu0
  %2891 = vmatprep.mubr.f32.mxu0 0.0
  %2892 = vmatmul.mubr.f32.gmra.mrb[0].mxu0 %v2509
  %v2893 = vpop.f32.mrb[0].mxu0
  %v2894 = vadd.f32 0.0, %v2893
  %v2895 = vpop.f32.mrb[0].mxu0
  %2896 = vmatprep.mubr.f32.mxu0 0.0
  %2897 = vmatmul.mubr.f32.gmra.mrb[0].mxu0 %v2512
  %v2898 = vpop.f32.mrb[0].mxu0
  %v2899 = vadd.f32 0.0, %v2898
  %v2900 = vpop.f32.mrb[0].mxu0
  %2901 = vdwg.mxu0
  %v2902 = vadd.f32 %v2194, %v2584
  %v2903 = vadd.f32 %v2195, %v2589
  %v2904 = vadd.f32 %v2196, %v2594
  %v2905 = vadd.f32 %v2197, %v2599
  %v2906 = vadd.f32 %v2198, %v2604
  %v2907 = vadd.f32 %v2199, %v2609
  %v2908 = vadd.f32 %v2200, %v2614
  %v2909 = vadd.f32 %v2201, %v2619
  %v2910 = vadd.f32 %v2202, %v2624
  %v2911 = vadd.f32 %v2203, %v2629
  %v2912 = vadd.f32 %v2204, %v2634
  %v2913 = vadd.f32 %v2205, %v2639
  %v2914 = vadd.f32 %v2206, %v2644
  %v2915 = vadd.f32 %v2207, %v2649
  %v2916 = vadd.f32 %v2208, %v2654
  %v2917 = vadd.f32 %v2209, %v2659
  %v2918 = vadd.f32 %v2210, %v2664
  %v2919 = vadd.f32 %v2211, %v2669
  %v2920 = vadd.f32 %v2212, %v2674
  %v2921 = vadd.f32 %v2213, %v2679
  %v2922 = vadd.f32 %v2214, %v2684
  %v2923 = vadd.f32 %v2215, %v2689
  %v2924 = vadd.f32 %v2216, %v2694
  %v2925 = vadd.f32 %v2217, %v2699
  %v2926 = vadd.f32 %v2218, %v2704
  %v2927 = vadd.f32 %v2219, %v2709
  %v2928 = vadd.f32 %v2220, %v2714
  %v2929 = vadd.f32 %v2221, %v2719
  %v2930 = vadd.f32 %v2222, %v2724
  %v2931 = vadd.f32 %v2223, %v2729
  %v2932 = vadd.f32 %v2224, %v2734
  %v2933 = vadd.f32 %v2225, %v2739
  %v2934 = vadd.f32 %v2226, %v2744
  %v2935 = vadd.f32 %v2227, %v2749
  %v2936 = vadd.f32 %v2228, %v2754
  %v2937 = vadd.f32 %v2229, %v2759
  %v2938 = vadd.f32 %v2230, %v2764
  %v2939 = vadd.f32 %v2231, %v2769
  %v2940 = vadd.f32 %v2232, %v2774
  %v2941 = vadd.f32 %v2233, %v2779
  %v2942 = vadd.f32 %v2234, %v2784
  %v2943 = vadd.f32 %v2235, %v2789
  %v2944 = vadd.f32 %v2236, %v2794
  %v2945 = vadd.f32 %v2237, %v2799
  %v2946 = vadd.f32 %v2238, %v2804
  %v2947 = vadd.f32 %v2239, %v2809
  %v2948 = vadd.f32 %v2240, %v2814
  %v2949 = vadd.f32 %v2241, %v2819
  %v2950 = vadd.f32 %v2242, %v2824
  %v2951 = vadd.f32 %v2243, %v2829
  %v2952 = vadd.f32 %v2244, %v2834
  %v2953 = vadd.f32 %v2245, %v2839
  %v2954 = vadd.f32 %v2246, %v2844
  %v2955 = vadd.f32 %v2247, %v2849
  %v2956 = vadd.f32 %v2248, %v2854
  %v2957 = vadd.f32 %v2249, %v2859
  %v2958 = vadd.f32 %v2250, %v2864
  %v2959 = vadd.f32 %v2251, %v2869
  %v2960 = vadd.f32 %v2252, %v2874
  %v2961 = vadd.f32 %v2253, %v2879
  %v2962 = vadd.f32 %v2254, %v2884
  %v2963 = vadd.f32 %v2255, %v2889
  %v2964 = vadd.f32 %v2256, %v2894
  %v2965 = vadd.f32 %v2257, %v2899
  %v2966 = vld [vmem:[%s196 + $0x1] sm:$0xff]
  %v2967 = vld [vmem:[%s196 + $0x9] sm:$0xff]
  %v2968 = vld [vmem:[%s196 + $0x19] sm:$0xff]
  %v2969 = vld [vmem:[%s196 + $0x21] sm:$0xff]
  %v2970 = vld [vmem:[%s196 + $0x31] sm:$0xff]
  %v2971 = vld [vmem:[%s196 + $0x39] sm:$0xff]
  %v2972 = vld [vmem:[%s196 + $0x49] sm:$0xff]
  %v2973 = vld [vmem:[%s196 + $0x51] sm:$0xff]
  %v2974 = vld [vmem:[%s196 + $0x61] sm:$0xff]
  %v2975 = vld [vmem:[%s196 + $0x69] sm:$0xff]
  %v2976 = vld [vmem:[%s196 + $0x79] sm:$0xff]
  %v2977 = vld [vmem:[%s196 + $0x81] sm:$0xff]
  %v2978 = vld [vmem:[%s196 + $0x91] sm:$0xff]
  %v2979 = vld [vmem:[%s196 + $0x99] sm:$0xff]
  %v2980 = vld [vmem:[%s196 + $0xa9] sm:$0xff]
  %v2981 = vld [vmem:[%s196 + $0xb1] sm:$0xff]
  %v2982 = vld [vmem:[%s196 + $0xc1] sm:$0xff]
  %v2983 = vld [vmem:[%s196 + $0xc9] sm:$0xff]
  %v2984 = vld [vmem:[%s196 + $0xd9] sm:$0xff]
  %v2985 = vld [vmem:[%s196 + $0xe1] sm:$0xff]
  %v2986 = vld [vmem:[%s196 + $0xf1] sm:$0xff]
  %v2987 = vld [vmem:[%s196 + $0xf9] sm:$0xff]
  %v2988 = vld [vmem:[%s196 + $0x109] sm:$0xff]
  %v2989 = vld [vmem:[%s196 + $0x111] sm:$0xff]
  %v2990 = vld [vmem:[%s196 + $0x121] sm:$0xff]
  %v2991 = vld [vmem:[%s196 + $0x129] sm:$0xff]
  %v2992 = vld [vmem:[%s196 + $0x139] sm:$0xff]
  %v2993 = vld [vmem:[%s196 + $0x141] sm:$0xff]
  %v2994 = vld [vmem:[%s196 + $0x151] sm:$0xff]
  %v2995 = vld [vmem:[%s196 + $0x159] sm:$0xff]
  %v2996 = vld [vmem:[%s196 + $0x169] sm:$0xff]
  %v2997 = vld [vmem:[%s196 + $0x171] sm:$0xff]
  %v2998 = vld [vmem:[%s196 + $0x1b1] sm:$0xff]
  %v2999 = vld [vmem:[%s196 + $0x1b9] sm:$0xff]
  %v3000 = vld [vmem:[%s196 + $0x1c9] sm:$0xff]
  %v3001 = vld [vmem:[%s196 + $0x1d1] sm:$0xff]
  %v3002 = vld [vmem:[%s196 + $0x1e1] sm:$0xff]
  %v3003 = vld [vmem:[%s196 + $0x1e9] sm:$0xff]
  %v3004 = vld [vmem:[%s196 + $0x1f9] sm:$0xff]
  %v3005 = vld [vmem:[%s196 + $0x201] sm:$0xff]
  %v3006 = vld [vmem:[%s196 + $0x211] sm:$0xff]
  %v3007 = vld [vmem:[%s196 + $0x219] sm:$0xff]
  %v3008 = vld [vmem:[%s196 + $0x229] sm:$0xff]
  %v3009 = vld [vmem:[%s196 + $0x231] sm:$0xff]
  %v3010 = vld [vmem:[%s196 + $0x241] sm:$0xff]
  %v3011 = vld [vmem:[%s196 + $0x249] sm:$0xff]
  %v3012 = vld [vmem:[%s196 + $0x259] sm:$0xff]
  %v3013 = vld [vmem:[%s196 + $0x261] sm:$0xff]
  %v3014 = vld [vmem:[%s196 + $0x271] sm:$0xff]
  %v3015 = vld [vmem:[%s196 + $0x279] sm:$0xff]
  %v3016 = vld [vmem:[%s196 + $0x289] sm:$0xff]
  %v3017 = vld [vmem:[%s196 + $0x291] sm:$0xff]
  %v3018 = vld [vmem:[%s196 + $0x2a1] sm:$0xff]
  %v3019 = vld [vmem:[%s196 + $0x2a9] sm:$0xff]
  %v3020 = vld [vmem:[%s196 + $0x2b9] sm:$0xff]
  %v3021 = vld [vmem:[%s196 + $0x2c1] sm:$0xff]
  %v3022 = vld [vmem:[%s196 + $0x2d1] sm:$0xff]
  %v3023 = vld [vmem:[%s196 + $0x2d9] sm:$0xff]
  %v3024 = vld [vmem:[%s196 + $0x2e9] sm:$0xff]
  %v3025 = vld [vmem:[%s196 + $0x2f1] sm:$0xff]
  %v3026 = vld [vmem:[%s196 + $0x301] sm:$0xff]
  %v3027 = vld [vmem:[%s196 + $0x309] sm:$0xff]
  %v3028 = vld [vmem:[%s196 + $0x319] sm:$0xff]
  %v3029 = vld [vmem:[%s196 + $0x321] sm:$0xff]
  %v3031 = vsel %vm44, %v2966, 0
  %v3034 = vsel %vm44, %v2967, 0
  %v3037 = vsel %vm44, %v2968, 0
  %v3040 = vsel %vm44, %v2969, 0
  %v3043 = vsel %vm44, %v2970, 0
  %v3046 = vsel %vm44, %v2971, 0
  %v3049 = vsel %vm44, %v2972, 0
  %v3052 = vsel %vm44, %v2973, 0
  %v3055 = vsel %vm44, %v2974, 0
  %v3058 = vsel %vm44, %v2975, 0
  %v3061 = vsel %vm44, %v2976, 0
  %v3064 = vsel %vm44, %v2977, 0
  %v3067 = vsel %vm44, %v2978, 0
  %v3070 = vsel %vm44, %v2979, 0
  %v3073 = vsel %vm44, %v2980, 0
  %v3076 = vsel %vm44, %v2981, 0
  %v3079 = vsel %vm44, %v2982, 0
  %v3082 = vsel %vm44, %v2983, 0
  %v3085 = vsel %vm44, %v2984, 0
  %v3088 = vsel %vm44, %v2985, 0
  %v3091 = vsel %vm44, %v2986, 0
  %v3094 = vsel %vm44, %v2987, 0
  %v3097 = vsel %vm44, %v2988, 0
  %v3100 = vsel %vm44, %v2989, 0
  %v3103 = vsel %vm44, %v2990, 0
  %v3106 = vsel %vm44, %v2991, 0
  %v3109 = vsel %vm44, %v2992, 0
  %v3112 = vsel %vm44, %v2993, 0
  %v3115 = vsel %vm44, %v2994, 0
  %v3118 = vsel %vm44, %v2995, 0
  %v3121 = vsel %vm44, %v2996, 0
  %v3124 = vsel %vm44, %v2997, 0
  %v3127 = vsel %vm44, %v2998, 0
  %v3130 = vsel %vm44, %v2999, 0
  %v3133 = vsel %vm44, %v3000, 0
  %v3136 = vsel %vm44, %v3001, 0
  %v3139 = vsel %vm44, %v3002, 0
  %v3142 = vsel %vm44, %v3003, 0
  %v3145 = vsel %vm44, %v3004, 0
  %v3148 = vsel %vm44, %v3005, 0
  %v3151 = vsel %vm44, %v3006, 0
  %v3154 = vsel %vm44, %v3007, 0
  %v3157 = vsel %vm44, %v3008, 0
  %v3160 = vsel %vm44, %v3009, 0
  %v3163 = vsel %vm44, %v3010, 0
  %v3166 = vsel %vm44, %v3011, 0
  %v3169 = vsel %vm44, %v3012, 0
  %v3172 = vsel %vm44, %v3013, 0
  %v3175 = vsel %vm44, %v3014, 0
  %v3178 = vsel %vm44, %v3015, 0
  %v3181 = vsel %vm44, %v3016, 0
  %v3184 = vsel %vm44, %v3017, 0
  %v3187 = vsel %vm44, %v3018, 0
  %v3190 = vsel %vm44, %v3019, 0
  %v3193 = vsel %vm44, %v3020, 0
  %v3196 = vsel %vm44, %v3021, 0
  %v3199 = vsel %vm44, %v3022, 0
  %v3202 = vsel %vm44, %v3023, 0
  %v3205 = vsel %vm44, %v3024, 0
  %v3208 = vsel %vm44, %v3025, 0
  %v3211 = vsel %vm44, %v3026, 0
  %v3214 = vsel %vm44, %v3027, 0
  %v3217 = vsel %vm44, %v3028, 0
  %v3220 = vsel %vm44, %v3029, 0
  %v3223 = vsel %vm581, %v30, 0
  %3225 = vmatprep.subr.mxu0 0.0
  %3226 = vmatpush1.msra.mxu0 %v3223
  %3227 = vmatprep.subr.mxu0 0.0
  %3228 = vmatpush1.msra.mxu0 0.0
  %3229 = vmatprep.subr.mxu0 0.0
  %3230 = vmatpush1.msra.mxu0 0.0
  %3231 = vmatprep.subr.mxu0 0.0
  %3232 = vmatpush1.msra.mxu0 0.0
  %3233 = vmatprep.subr.mxu0 0.0
  %3234 = vmatpush1.msra.mxu0 0.0
  %3235 = vmatprep.subr.mxu0 0.0
  %3236 = vmatpush1.msra.mxu0 0.0
  %3237 = vmatprep.subr.mxu0 0.0
  %3238 = vmatpush1.msra.mxu0 0.0
  %3239 = vmatprep.subr.mxu0 0.0
  %3240 = vmatpush1.msra.mxu0 0.0
  %3241 = vmatprep.subr.mxu0 0.0
  %3242 = vmatpush1.msra.mxu0 0.0
  %3243 = vmatprep.subr.mxu0 0.0
  %3244 = vmatpush1.msra.mxu0 0.0
  %3245 = vmatprep.subr.mxu0 0.0
  %3246 = vmatpush1.msra.mxu0 0.0
  %3247 = vmatprep.subr.mxu0 0.0
  %3248 = vmatpush1.msra.mxu0 0.0
  %3249 = vmatprep.subr.mxu0 0.0
  %3250 = vmatpush1.msra.mxu0 0.0
  %3251 = vmatprep.subr.mxu0 0.0
  %3252 = vmatpush1.msra.mxu0 0.0
  %3253 = vmatprep.subr.mxu0 0.0
  %3254 = vmatpush1.msra.mxu0 0.0
  %3255 = vmatprep.subr.mxu0 0.0
  %3256 = vmatpush1.msra.mxu0 0.0
  %3257 = vmatprep.subr.mxu0 0.0
  %3258 = vmatpush1.msra.mxu0 0.0
  %3259 = vmatprep.subr.mxu0 0.0
  %3260 = vmatpush1.msra.mxu0 0.0
  %3261 = vmatprep.subr.mxu0 0.0
  %3262 = vmatpush1.msra.mxu0 0.0
  %3263 = vmatprep.subr.mxu0 0.0
  %3264 = vmatpush1.msra.mxu0 0.0
  %3265 = vmatprep.subr.mxu0 0.0
  %3266 = vmatpush1.msra.mxu0 0.0
  %3267 = vmatprep.subr.mxu0 0.0
  %3268 = vmatpush1.msra.mxu0 0.0
  %3269 = vmatprep.subr.mxu0 0.0
  %3270 = vmatpush1.msra.mxu0 0.0
  %3271 = vmatprep.subr.mxu0 0.0
  %3272 = vmatpush1.msra.mxu0 0.0
  %3273 = vmatprep.subr.mxu0 0.0
  %3274 = vmatpush1.msra.mxu0 0.0
  %3275 = vmatprep.subr.mxu0 0.0
  %3276 = vmatpush1.msra.mxu0 0.0
  %3277 = vmatprep.subr.mxu0 0.0
  %3278 = vmatpush1.msra.mxu0 0.0
  %3279 = vmatprep.subr.mxu0 0.0
  %3280 = vmatpush1.msra.mxu0 0.0
  %3281 = vmatprep.subr.mxu0 0.0
  %3282 = vmatpush1.msra.mxu0 0.0
  %3283 = vmatprep.subr.mxu0 0.0
  %3284 = vmatpush1.msra.mxu0 0.0
  %3285 = vmatprep.subr.mxu0 0.0
  %3286 = vmatpush1.msra.mxu0 0.0
  %3287 = vmatprep.subr.mxu0 0.0
  %3288 = vmatpush1.msra.mxu0 0.0
  %3289 = vmatprep.mubr.f32.mxu0 0.0
  %3290 = vmatmul.mubr.f32.gmra.mrb[0].mxu0 %v3031
  %v3291 = vpop.f32.mrb[0].mxu0
  %v3292 = vadd.f32 0.0, %v3291
  %v3293 = vpop.f32.mrb[0].mxu0
  %3294 = vmatprep.mubr.f32.mxu0 0.0
  %3295 = vmatmul.mubr.f32.gmra.mrb[0].mxu0 %v3034
  %v3296 = vpop.f32.mrb[0].mxu0
  %v3297 = vadd.f32 0.0, %v3296
  %v3298 = vpop.f32.mrb[0].mxu0
  %3299 = vmatprep.mubr.f32.mxu0 0.0
  %3300 = vmatmul.mubr.f32.gmra.mrb[0].mxu0 %v3037
  %v3301 = vpop.f32.mrb[0].mxu0
  %v3302 = vadd.f32 0.0, %v3301
  %v3303 = vpop.f32.mrb[0].mxu0
  %3304 = vmatprep.mubr.f32.mxu0 0.0
  %3305 = vmatmul.mubr.f32.gmra.mrb[0].mxu0 %v3040
  %v3306 = vpop.f32.mrb[0].mxu0
  %v3307 = vadd.f32 0.0, %v3306
  %v3308 = vpop.f32.mrb[0].mxu0
  %3309 = vmatprep.mubr.f32.mxu0 0.0
  %3310 = vmatmul.mubr.f32.gmra.mrb[0].mxu0 %v3043
  %v3311 = vpop.f32.mrb[0].mxu0
  %v3312 = vadd.f32 0.0, %v3311
  %v3313 = vpop.f32.mrb[0].mxu0
  %3314 = vmatprep.mubr.f32.mxu0 0.0
  %3315 = vmatmul.mubr.f32.gmra.mrb[0].mxu0 %v3046
  %v3316 = vpop.f32.mrb[0].mxu0
  %v3317 = vadd.f32 0.0, %v3316
  %v3318 = vpop.f32.mrb[0].mxu0
  %3319 = vmatprep.mubr.f32.mxu0 0.0
  %3320 = vmatmul.mubr.f32.gmra.mrb[0].mxu0 %v3049
  %v3321 = vpop.f32.mrb[0].mxu0
  %v3322 = vadd.f32 0.0, %v3321
  %v3323 = vpop.f32.mrb[0].mxu0
  %3324 = vmatprep.mubr.f32.mxu0 0.0
  %3325 = vmatmul.mubr.f32.gmra.mrb[0].mxu0 %v3052
  %v3326 = vpop.f32.mrb[0].mxu0
  %v3327 = vadd.f32 0.0, %v3326
  %v3328 = vpop.f32.mrb[0].mxu0
  %3329 = vmatprep.mubr.f32.mxu0 0.0
  %3330 = vmatmul.mubr.f32.gmra.mrb[0].mxu0 %v3055
  %v3331 = vpop.f32.mrb[0].mxu0
  %v3332 = vadd.f32 0.0, %v3331
  %v3333 = vpop.f32.mrb[0].mxu0
  %3334 = vmatprep.mubr.f32.mxu0 0.0
  %3335 = vmatmul.mubr.f32.gmra.mrb[0].mxu0 %v3058
  %v3336 = vpop.f32.mrb[0].mxu0
  %v3337 = vadd.f32 0.0, %v3336
  %v3338 = vpop.f32.mrb[0].mxu0
  %3339 = vmatprep.mubr.f32.mxu0 0.0
  %3340 = vmatmul.mubr.f32.gmra.mrb[0].mxu0 %v3061
  %v3341 = vpop.f32.mrb[0].mxu0
  %v3342 = vadd.f32 0.0, %v3341
  %v3343 = vpop.f32.mrb[0].mxu0
  %3344 = vmatprep.mubr.f32.mxu0 0.0
  %3345 = vmatmul.mubr.f32.gmra.mrb[0].mxu0 %v3064
  %v3346 = vpop.f32.mrb[0].mxu0
  %v3347 = vadd.f32 0.0, %v3346
  %v3348 = vpop.f32.mrb[0].mxu0
  %3349 = vmatprep.mubr.f32.mxu0 0.0
  %3350 = vmatmul.mubr.f32.gmra.mrb[0].mxu0 %v3067
  %v3351 = vpop.f32.mrb[0].mxu0
  %v3352 = vadd.f32 0.0, %v3351
  %v3353 = vpop.f32.mrb[0].mxu0
  %3354 = vmatprep.mubr.f32.mxu0 0.0
  %3355 = vmatmul.mubr.f32.gmra.mrb[0].mxu0 %v3070
  %v3356 = vpop.f32.mrb[0].mxu0
  %v3357 = vadd.f32 0.0, %v3356
  %v3358 = vpop.f32.mrb[0].mxu0
  %3359 = vmatprep.mubr.f32.mxu0 0.0
  %3360 = vmatmul.mubr.f32.gmra.mrb[0].mxu0 %v3073
  %v3361 = vpop.f32.mrb[0].mxu0
  %v3362 = vadd.f32 0.0, %v3361
  %v3363 = vpop.f32.mrb[0].mxu0
  %3364 = vmatprep.mubr.f32.mxu0 0.0
  %3365 = vmatmul.mubr.f32.gmra.mrb[0].mxu0 %v3076
  %v3366 = vpop.f32.mrb[0].mxu0
  %v3367 = vadd.f32 0.0, %v3366
  %v3368 = vpop.f32.mrb[0].mxu0
  %3369 = vmatprep.mubr.f32.mxu0 0.0
  %3370 = vmatmul.mubr.f32.gmra.mrb[0].mxu0 %v3079
  %v3371 = vpop.f32.mrb[0].mxu0
  %v3372 = vadd.f32 0.0, %v3371
  %v3373 = vpop.f32.mrb[0].mxu0
  %3374 = vmatprep.mubr.f32.mxu0 0.0
  %3375 = vmatmul.mubr.f32.gmra.mrb[0].mxu0 %v3082
  %v3376 = vpop.f32.mrb[0].mxu0
  %v3377 = vadd.f32 0.0, %v3376
  %v3378 = vpop.f32.mrb[0].mxu0
  %3379 = vmatprep.mubr.f32.mxu0 0.0
  %3380 = vmatmul.mubr.f32.gmra.mrb[0].mxu0 %v3085
  %v3381 = vpop.f32.mrb[0].mxu0
  %v3382 = vadd.f32 0.0, %v3381
  %v3383 = vpop.f32.mrb[0].mxu0
  %3384 = vmatprep.mubr.f32.mxu0 0.0
  %3385 = vmatmul.mubr.f32.gmra.mrb[0].mxu0 %v3088
  %v3386 = vpop.f32.mrb[0].mxu0
  %v3387 = vadd.f32 0.0, %v3386
  %v3388 = vpop.f32.mrb[0].mxu0
  %3389 = vmatprep.mubr.f32.mxu0 0.0
  %3390 = vmatmul.mubr.f32.gmra.mrb[0].mxu0 %v3091
  %v3391 = vpop.f32.mrb[0].mxu0
  %v3392 = vadd.f32 0.0, %v3391
  %v3393 = vpop.f32.mrb[0].mxu0
  %3394 = vmatprep.mubr.f32.mxu0 0.0
  %3395 = vmatmul.mubr.f32.gmra.mrb[0].mxu0 %v3094
  %v3396 = vpop.f32.mrb[0].mxu0
  %v3397 = vadd.f32 0.0, %v3396
  %v3398 = vpop.f32.mrb[0].mxu0
  %3399 = vmatprep.mubr.f32.mxu0 0.0
  %3400 = vmatmul.mubr.f32.gmra.mrb[0].mxu0 %v3097
  %v3401 = vpop.f32.mrb[0].mxu0
  %v3402 = vadd.f32 0.0, %v3401
  %v3403 = vpop.f32.mrb[0].mxu0
  %3404 = vmatprep.mubr.f32.mxu0 0.0
  %3405 = vmatmul.mubr.f32.gmra.mrb[0].mxu0 %v3100
  %v3406 = vpop.f32.mrb[0].mxu0
  %v3407 = vadd.f32 0.0, %v3406
  %v3408 = vpop.f32.mrb[0].mxu0
  %3409 = vmatprep.mubr.f32.mxu0 0.0
  %3410 = vmatmul.mubr.f32.gmra.mrb[0].mxu0 %v3103
  %v3411 = vpop.f32.mrb[0].mxu0
  %v3412 = vadd.f32 0.0, %v3411
  %v3413 = vpop.f32.mrb[0].mxu0
  %3414 = vmatprep.mubr.f32.mxu0 0.0
  %3415 = vmatmul.mubr.f32.gmra.mrb[0].mxu0 %v3106
  %v3416 = vpop.f32.mrb[0].mxu0
  %v3417 = vadd.f32 0.0, %v3416
  %v3418 = vpop.f32.mrb[0].mxu0
  %3419 = vmatprep.mubr.f32.mxu0 0.0
  %3420 = vmatmul.mubr.f32.gmra.mrb[0].mxu0 %v3109
  %v3421 = vpop.f32.mrb[0].mxu0
  %v3422 = vadd.f32 0.0, %v3421
  %v3423 = vpop.f32.mrb[0].mxu0
  %3424 = vmatprep.mubr.f32.mxu0 0.0
  %3425 = vmatmul.mubr.f32.gmra.mrb[0].mxu0 %v3112
  %v3426 = vpop.f32.mrb[0].mxu0
  %v3427 = vadd.f32 0.0, %v3426
  %v3428 = vpop.f32.mrb[0].mxu0
  %3429 = vmatprep.mubr.f32.mxu0 0.0
  %3430 = vmatmul.mubr.f32.gmra.mrb[0].mxu0 %v3115
  %v3431 = vpop.f32.mrb[0].mxu0
  %v3432 = vadd.f32 0.0, %v3431
  %v3433 = vpop.f32.mrb[0].mxu0
  %3434 = vmatprep.mubr.f32.mxu0 0.0
  %3435 = vmatmul.mubr.f32.gmra.mrb[0].mxu0 %v3118
  %v3436 = vpop.f32.mrb[0].mxu0
  %v3437 = vadd.f32 0.0, %v3436
  %v3438 = vpop.f32.mrb[0].mxu0
  %3439 = vmatprep.mubr.f32.mxu0 0.0
  %3440 = vmatmul.mubr.f32.gmra.mrb[0].mxu0 %v3121
  %v3441 = vpop.f32.mrb[0].mxu0
  %v3442 = vadd.f32 0.0, %v3441
  %v3443 = vpop.f32.mrb[0].mxu0
  %3444 = vmatprep.mubr.f32.mxu0 0.0
  %3445 = vmatmul.mubr.f32.gmra.mrb[0].mxu0 %v3124
  %v3446 = vpop.f32.mrb[0].mxu0
  %v3447 = vadd.f32 0.0, %v3446
  %v3448 = vpop.f32.mrb[0].mxu0
  %3449 = vmatprep.mubr.f32.mxu0 0.0
  %3450 = vmatmul.mubr.f32.gmra.mrb[0].mxu0 %v3127
  %v3451 = vpop.f32.mrb[0].mxu0
  %v3452 = vadd.f32 0.0, %v3451
  %v3453 = vpop.f32.mrb[0].mxu0
  %3454 = vmatprep.mubr.f32.mxu0 0.0
  %3455 = vmatmul.mubr.f32.gmra.mrb[0].mxu0 %v3130
  %v3456 = vpop.f32.mrb[0].mxu0
  %v3457 = vadd.f32 0.0, %v3456
  %v3458 = vpop.f32.mrb[0].mxu0
  %3459 = vmatprep.mubr.f32.mxu0 0.0
  %3460 = vmatmul.mubr.f32.gmra.mrb[0].mxu0 %v3133
  %v3461 = vpop.f32.mrb[0].mxu0
  %v3462 = vadd.f32 0.0, %v3461
  %v3463 = vpop.f32.mrb[0].mxu0
  %3464 = vmatprep.mubr.f32.mxu0 0.0
  %3465 = vmatmul.mubr.f32.gmra.mrb[0].mxu0 %v3136
  %v3466 = vpop.f32.mrb[0].mxu0
  %v3467 = vadd.f32 0.0, %v3466
  %v3468 = vpop.f32.mrb[0].mxu0
  %3469 = vmatprep.mubr.f32.mxu0 0.0
  %3470 = vmatmul.mubr.f32.gmra.mrb[0].mxu0 %v3139
  %v3471 = vpop.f32.mrb[0].mxu0
  %v3472 = vadd.f32 0.0, %v3471
  %v3473 = vpop.f32.mrb[0].mxu0
  %3474 = vmatprep.mubr.f32.mxu0 0.0
  %3475 = vmatmul.mubr.f32.gmra.mrb[0].mxu0 %v3142
  %v3476 = vpop.f32.mrb[0].mxu0
  %v3477 = vadd.f32 0.0, %v3476
  %v3478 = vpop.f32.mrb[0].mxu0
  %3479 = vmatprep.mubr.f32.mxu0 0.0
  %3480 = vmatmul.mubr.f32.gmra.mrb[0].mxu0 %v3145
  %v3481 = vpop.f32.mrb[0].mxu0
  %v3482 = vadd.f32 0.0, %v3481
  %v3483 = vpop.f32.mrb[0].mxu0
  %3484 = vmatprep.mubr.f32.mxu0 0.0
  %3485 = vmatmul.mubr.f32.gmra.mrb[0].mxu0 %v3148
  %v3486 = vpop.f32.mrb[0].mxu0
  %v3487 = vadd.f32 0.0, %v3486
  %v3488 = vpop.f32.mrb[0].mxu0
  %3489 = vmatprep.mubr.f32.mxu0 0.0
  %3490 = vmatmul.mubr.f32.gmra.mrb[0].mxu0 %v3151
  %v3491 = vpop.f32.mrb[0].mxu0
  %v3492 = vadd.f32 0.0, %v3491
  %v3493 = vpop.f32.mrb[0].mxu0
  %3494 = vmatprep.mubr.f32.mxu0 0.0
  %3495 = vmatmul.mubr.f32.gmra.mrb[0].mxu0 %v3154
  %v3496 = vpop.f32.mrb[0].mxu0
  %v3497 = vadd.f32 0.0, %v3496
  %v3498 = vpop.f32.mrb[0].mxu0
  %3499 = vmatprep.mubr.f32.mxu0 0.0
  %3500 = vmatmul.mubr.f32.gmra.mrb[0].mxu0 %v3157
  %v3501 = vpop.f32.mrb[0].mxu0
  %v3502 = vadd.f32 0.0, %v3501
  %v3503 = vpop.f32.mrb[0].mxu0
  %3504 = vmatprep.mubr.f32.mxu0 0.0
  %3505 = vmatmul.mubr.f32.gmra.mrb[0].mxu0 %v3160
  %v3506 = vpop.f32.mrb[0].mxu0
  %v3507 = vadd.f32 0.0, %v3506
  %v3508 = vpop.f32.mrb[0].mxu0
  %3509 = vmatprep.mubr.f32.mxu0 0.0
  %3510 = vmatmul.mubr.f32.gmra.mrb[0].mxu0 %v3163
  %v3511 = vpop.f32.mrb[0].mxu0
  %v3512 = vadd.f32 0.0, %v3511
  %v3513 = vpop.f32.mrb[0].mxu0
  %3514 = vmatprep.mubr.f32.mxu0 0.0
  %3515 = vmatmul.mubr.f32.gmra.mrb[0].mxu0 %v3166
  %v3516 = vpop.f32.mrb[0].mxu0
  %v3517 = vadd.f32 0.0, %v3516
  %v3518 = vpop.f32.mrb[0].mxu0
  %3519 = vmatprep.mubr.f32.mxu0 0.0
  %3520 = vmatmul.mubr.f32.gmra.mrb[0].mxu0 %v3169
  %v3521 = vpop.f32.mrb[0].mxu0
  %v3522 = vadd.f32 0.0, %v3521
  %v3523 = vpop.f32.mrb[0].mxu0
  %3524 = vmatprep.mubr.f32.mxu0 0.0
  %3525 = vmatmul.mubr.f32.gmra.mrb[0].mxu0 %v3172
  %v3526 = vpop.f32.mrb[0].mxu0
  %v3527 = vadd.f32 0.0, %v3526
  %v3528 = vpop.f32.mrb[0].mxu0
  %3529 = vmatprep.mubr.f32.mxu0 0.0
  %3530 = vmatmul.mubr.f32.gmra.mrb[0].mxu0 %v3175
  %v3531 = vpop.f32.mrb[0].mxu0
  %v3532 = vadd.f32 0.0, %v3531
  %v3533 = vpop.f32.mrb[0].mxu0
  %3534 = vmatprep.mubr.f32.mxu0 0.0
  %3535 = vmatmul.mubr.f32.gmra.mrb[0].mxu0 %v3178
  %v3536 = vpop.f32.mrb[0].mxu0
  %v3537 = vadd.f32 0.0, %v3536
  %v3538 = vpop.f32.mrb[0].mxu0
  %3539 = vmatprep.mubr.f32.mxu0 0.0
  %3540 = vmatmul.mubr.f32.gmra.mrb[0].mxu0 %v3181
  %v3541 = vpop.f32.mrb[0].mxu0
  %v3542 = vadd.f32 0.0, %v3541
  %v3543 = vpop.f32.mrb[0].mxu0
  %3544 = vmatprep.mubr.f32.mxu0 0.0
  %3545 = vmatmul.mubr.f32.gmra.mrb[0].mxu0 %v3184
  %v3546 = vpop.f32.mrb[0].mxu0
  %v3547 = vadd.f32 0.0, %v3546
  %v3548 = vpop.f32.mrb[0].mxu0
  %3549 = vmatprep.mubr.f32.mxu0 0.0
  %3550 = vmatmul.mubr.f32.gmra.mrb[0].mxu0 %v3187
  %v3551 = vpop.f32.mrb[0].mxu0
  %v3552 = vadd.f32 0.0, %v3551
  %v3553 = vpop.f32.mrb[0].mxu0
  %3554 = vmatprep.mubr.f32.mxu0 0.0
  %3555 = vmatmul.mubr.f32.gmra.mrb[0].mxu0 %v3190
  %v3556 = vpop.f32.mrb[0].mxu0
  %v3557 = vadd.f32 0.0, %v3556
  %v3558 = vpop.f32.mrb[0].mxu0
  %3559 = vmatprep.mubr.f32.mxu0 0.0
  %3560 = vmatmul.mubr.f32.gmra.mrb[0].mxu0 %v3193
  %v3561 = vpop.f32.mrb[0].mxu0
  %v3562 = vadd.f32 0.0, %v3561
  %v3563 = vpop.f32.mrb[0].mxu0
  %3564 = vmatprep.mubr.f32.mxu0 0.0
  %3565 = vmatmul.mubr.f32.gmra.mrb[0].mxu0 %v3196
  %v3566 = vpop.f32.mrb[0].mxu0
  %v3567 = vadd.f32 0.0, %v3566
  %v3568 = vpop.f32.mrb[0].mxu0
  %3569 = vmatprep.mubr.f32.mxu0 0.0
  %3570 = vmatmul.mubr.f32.gmra.mrb[0].mxu0 %v3199
  %v3571 = vpop.f32.mrb[0].mxu0
  %v3572 = vadd.f32 0.0, %v3571
  %v3573 = vpop.f32.mrb[0].mxu0
  %3574 = vmatprep.mubr.f32.mxu0 0.0
  %3575 = vmatmul.mubr.f32.gmra.mrb[0].mxu0 %v3202
  %v3576 = vpop.f32.mrb[0].mxu0
  %v3577 = vadd.f32 0.0, %v3576
  %v3578 = vpop.f32.mrb[0].mxu0
  %3579 = vmatprep.mubr.f32.mxu0 0.0
  %3580 = vmatmul.mubr.f32.gmra.mrb[0].mxu0 %v3205
  %v3581 = vpop.f32.mrb[0].mxu0
  %v3582 = vadd.f32 0.0, %v3581
  %v3583 = vpop.f32.mrb[0].mxu0
  %3584 = vmatprep.mubr.f32.mxu0 0.0
  %3585 = vmatmul.mubr.f32.gmra.mrb[0].mxu0 %v3208
  %v3586 = vpop.f32.mrb[0].mxu0
  %v3587 = vadd.f32 0.0, %v3586
  %v3588 = vpop.f32.mrb[0].mxu0
  %3589 = vmatprep.mubr.f32.mxu0 0.0
  %3590 = vmatmul.mubr.f32.gmra.mrb[0].mxu0 %v3211
  %v3591 = vpop.f32.mrb[0].mxu0
  %v3592 = vadd.f32 0.0, %v3591
  %v3593 = vpop.f32.mrb[0].mxu0
  %3594 = vmatprep.mubr.f32.mxu0 0.0
  %3595 = vmatmul.mubr.f32.gmra.mrb[0].mxu0 %v3214
  %v3596 = vpop.f32.mrb[0].mxu0
  %v3597 = vadd.f32 0.0, %v3596
  %v3598 = vpop.f32.mrb[0].mxu0
  %3599 = vmatprep.mubr.f32.mxu0 0.0
  %3600 = vmatmul.mubr.f32.gmra.mrb[0].mxu0 %v3217
  %v3601 = vpop.f32.mrb[0].mxu0
  %v3602 = vadd.f32 0.0, %v3601
  %v3603 = vpop.f32.mrb[0].mxu0
  %3604 = vmatprep.mubr.f32.mxu0 0.0
  %3605 = vmatmul.mubr.f32.gmra.mrb[0].mxu0 %v3220
  %v3606 = vpop.f32.mrb[0].mxu0
  %v3607 = vadd.f32 0.0, %v3606
  %v3608 = vpop.f32.mrb[0].mxu0
  %3609 = vdwg.mxu0
  %v3610 = vadd.f32 %v2902, %v3292
  %v3611 = vadd.f32 %v2903, %v3297
  %v3612 = vadd.f32 %v2904, %v3302
  %v3613 = vadd.f32 %v2905, %v3307
  %v3614 = vadd.f32 %v2906, %v3312
  %v3615 = vadd.f32 %v2907, %v3317
  %v3616 = vadd.f32 %v2908, %v3322
  %v3617 = vadd.f32 %v2909, %v3327
  %v3618 = vadd.f32 %v2910, %v3332
  %v3619 = vadd.f32 %v2911, %v3337
  %v3620 = vadd.f32 %v2912, %v3342
  %v3621 = vadd.f32 %v2913, %v3347
  %v3622 = vadd.f32 %v2914, %v3352
  %v3623 = vadd.f32 %v2915, %v3357
  %v3624 = vadd.f32 %v2916, %v3362
  %v3625 = vadd.f32 %v2917, %v3367
  %v3626 = vadd.f32 %v2918, %v3372
  %v3627 = vadd.f32 %v2919, %v3377
  %v3628 = vadd.f32 %v2920, %v3382
  %v3629 = vadd.f32 %v2921, %v3387
  %v3630 = vadd.f32 %v2922, %v3392
  %v3631 = vadd.f32 %v2923, %v3397
  %v3632 = vadd.f32 %v2924, %v3402
  %v3633 = vadd.f32 %v2925, %v3407
  %v3634 = vadd.f32 %v2926, %v3412
  %v3635 = vadd.f32 %v2927, %v3417
  %v3636 = vadd.f32 %v2928, %v3422
  %v3637 = vadd.f32 %v2929, %v3427
  %v3638 = vadd.f32 %v2930, %v3432
  %v3639 = vadd.f32 %v2931, %v3437
  %v3640 = vadd.f32 %v2932, %v3442
  %v3641 = vadd.f32 %v2933, %v3447
  %v3642 = vadd.f32 %v2934, %v3452
  %v3643 = vadd.f32 %v2935, %v3457
  %v3644 = vadd.f32 %v2936, %v3462
  %v3645 = vadd.f32 %v2937, %v3467
  %v3646 = vadd.f32 %v2938, %v3472
  %v3647 = vadd.f32 %v2939, %v3477
  %v3648 = vadd.f32 %v2940, %v3482
  %v3649 = vadd.f32 %v2941, %v3487
  %v3650 = vadd.f32 %v2942, %v3492
  %v3651 = vadd.f32 %v2943, %v3497
  %v3652 = vadd.f32 %v2944, %v3502
  %v3653 = vadd.f32 %v2945, %v3507
  %v3654 = vadd.f32 %v2946, %v3512
  %v3655 = vadd.f32 %v2947, %v3517
  %v3656 = vadd.f32 %v2948, %v3522
  %v3657 = vadd.f32 %v2949, %v3527
  %v3658 = vadd.f32 %v2950, %v3532
  %v3659 = vadd.f32 %v2951, %v3537
  %v3660 = vadd.f32 %v2952, %v3542
  %v3661 = vadd.f32 %v2953, %v3547
  %v3662 = vadd.f32 %v2954, %v3552
  %v3663 = vadd.f32 %v2955, %v3557
  %v3664 = vadd.f32 %v2956, %v3562
  %v3665 = vadd.f32 %v2957, %v3567
  %v3666 = vadd.f32 %v2958, %v3572
  %v3667 = vadd.f32 %v2959, %v3577
  %v3668 = vadd.f32 %v2960, %v3582
  %v3669 = vadd.f32 %v2961, %v3587
  %v3670 = vadd.f32 %v2962, %v3592
  %v3671 = vadd.f32 %v2963, %v3597
  %v3672 = vadd.f32 %v2964, %v3602
  %v3673 = vadd.f32 %v2965, %v3607
  %v3674 = vld [vmem:[%s196 + $0x2] sm:$0xff]
  %v3675 = vld [vmem:[%s196 + $0xa] sm:$0xff]
  %v3676 = vld [vmem:[%s196 + $0x1a] sm:$0xff]
  %v3677 = vld [vmem:[%s196 + $0x22] sm:$0xff]
  %v3678 = vld [vmem:[%s196 + $0x32] sm:$0xff]
  %v3679 = vld [vmem:[%s196 + $0x3a] sm:$0xff]
  %v3680 = vld [vmem:[%s196 + $0x4a] sm:$0xff]
  %v3681 = vld [vmem:[%s196 + $0x52] sm:$0xff]
  %v3682 = vld [vmem:[%s196 + $0x62] sm:$0xff]
  %v3683 = vld [vmem:[%s196 + $0x6a] sm:$0xff]
  %v3684 = vld [vmem:[%s196 + $0x7a] sm:$0xff]
  %v3685 = vld [vmem:[%s196 + $0x82] sm:$0xff]
  %v3686 = vld [vmem:[%s196 + $0x92] sm:$0xff]
  %v3687 = vld [vmem:[%s196 + $0x9a] sm:$0xff]
  %v3688 = vld [vmem:[%s196 + $0xaa] sm:$0xff]
  %v3689 = vld [vmem:[%s196 + $0xb2] sm:$0xff]
  %v3690 = vld [vmem:[%s196 + $0xc2] sm:$0xff]
  %v3691 = vld [vmem:[%s196 + $0xca] sm:$0xff]
  %v3692 = vld [vmem:[%s196 + $0xda] sm:$0xff]
  %v3693 = vld [vmem:[%s196 + $0xe2] sm:$0xff]
  %v3694 = vld [vmem:[%s196 + $0xf2] sm:$0xff]
  %v3695 = vld [vmem:[%s196 + $0xfa] sm:$0xff]
  %v3696 = vld [vmem:[%s196 + $0x10a] sm:$0xff]
  %v3697 = vld [vmem:[%s196 + $0x112] sm:$0xff]
  %v3698 = vld [vmem:[%s196 + $0x122] sm:$0xff]
  %v3699 = vld [vmem:[%s196 + $0x12a] sm:$0xff]
  %v3700 = vld [vmem:[%s196 + $0x13a] sm:$0xff]
  %v3701 = vld [vmem:[%s196 + $0x142] sm:$0xff]
  %v3702 = vld [vmem:[%s196 + $0x152] sm:$0xff]
  %v3703 = vld [vmem:[%s196 + $0x15a] sm:$0xff]
  %v3704 = vld [vmem:[%s196 + $0x16a] sm:$0xff]
  %v3705 = vld [vmem:[%s196 + $0x172] sm:$0xff]
  %v3706 = vld [vmem:[%s196 + $0x1b2] sm:$0xff]
  %v3707 = vld [vmem:[%s196 + $0x1ba] sm:$0xff]
  %v3708 = vld [vmem:[%s196 + $0x1ca] sm:$0xff]
  %v3709 = vld [vmem:[%s196 + $0x1d2] sm:$0xff]
  %v3710 = vld [vmem:[%s196 + $0x1e2] sm:$0xff]
  %v3711 = vld [vmem:[%s196 + $0x1ea] sm:$0xff]
  %v3712 = vld [vmem:[%s196 + $0x1fa] sm:$0xff]
  %v3713 = vld [vmem:[%s196 + $0x202] sm:$0xff]
  %v3714 = vld [vmem:[%s196 + $0x212] sm:$0xff]
  %v3715 = vld [vmem:[%s196 + $0x21a] sm:$0xff]
  %v3716 = vld [vmem:[%s196 + $0x22a] sm:$0xff]
  %v3717 = vld [vmem:[%s196 + $0x232] sm:$0xff]
  %v3718 = vld [vmem:[%s196 + $0x242] sm:$0xff]
  %v3719 = vld [vmem:[%s196 + $0x24a] sm:$0xff]
  %v3720 = vld [vmem:[%s196 + $0x25a] sm:$0xff]
  %v3721 = vld [vmem:[%s196 + $0x262] sm:$0xff]
  %v3722 = vld [vmem:[%s196 + $0x272] sm:$0xff]
  %v3723 = vld [vmem:[%s196 + $0x27a] sm:$0xff]
  %v3724 = vld [vmem:[%s196 + $0x28a] sm:$0xff]
  %v3725 = vld [vmem:[%s196 + $0x292] sm:$0xff]
  %v3726 = vld [vmem:[%s196 + $0x2a2] sm:$0xff]
  %v3727 = vld [vmem:[%s196 + $0x2aa] sm:$0xff]
  %v3728 = vld [vmem:[%s196 + $0x2ba] sm:$0xff]
  %v3729 = vld [vmem:[%s196 + $0x2c2] sm:$0xff]
  %v3730 = vld [vmem:[%s196 + $0x2d2] sm:$0xff]
  %v3731 = vld [vmem:[%s196 + $0x2da] sm:$0xff]
  %v3732 = vld [vmem:[%s196 + $0x2ea] sm:$0xff]
  %v3733 = vld [vmem:[%s196 + $0x2f2] sm:$0xff]
  %v3734 = vld [vmem:[%s196 + $0x302] sm:$0xff]
  %v3735 = vld [vmem:[%s196 + $0x30a] sm:$0xff]
  %v3736 = vld [vmem:[%s196 + $0x31a] sm:$0xff]
  %v3737 = vld [vmem:[%s196 + $0x322] sm:$0xff]
  %v3739 = vsel %vm44, %v3674, 0
  %v3742 = vsel %vm44, %v3675, 0
  %v3745 = vsel %vm44, %v3676, 0
  %v3748 = vsel %vm44, %v3677, 0
  %v3751 = vsel %vm44, %v3678, 0
  %v3754 = vsel %vm44, %v3679, 0
  %v3757 = vsel %vm44, %v3680, 0
  %v3760 = vsel %vm44, %v3681, 0
  %v3763 = vsel %vm44, %v3682, 0
  %v3766 = vsel %vm44, %v3683, 0
  %v3769 = vsel %vm44, %v3684, 0
  %v3772 = vsel %vm44, %v3685, 0
  %v3775 = vsel %vm44, %v3686, 0
  %v3778 = vsel %vm44, %v3687, 0
  %v3781 = vsel %vm44, %v3688, 0
  %v3784 = vsel %vm44, %v3689, 0
  %v3787 = vsel %vm44, %v3690, 0
  %v3790 = vsel %vm44, %v3691, 0
  %v3793 = vsel %vm44, %v3692, 0
  %v3796 = vsel %vm44, %v3693, 0
  %v3799 = vsel %vm44, %v3694, 0
  %v3802 = vsel %vm44, %v3695, 0
  %v3805 = vsel %vm44, %v3696, 0
  %v3808 = vsel %vm44, %v3697, 0
  %v3811 = vsel %vm44, %v3698, 0
  %v3814 = vsel %vm44, %v3699, 0
  %v3817 = vsel %vm44, %v3700, 0
  %v3820 = vsel %vm44, %v3701, 0
  %v3823 = vsel %vm44, %v3702, 0
  %v3826 = vsel %vm44, %v3703, 0
  %v3829 = vsel %vm44, %v3704, 0
  %v3832 = vsel %vm44, %v3705, 0
  %v3835 = vsel %vm44, %v3706, 0
  %v3838 = vsel %vm44, %v3707, 0
  %v3841 = vsel %vm44, %v3708, 0
  %v3844 = vsel %vm44, %v3709, 0
  %v3847 = vsel %vm44, %v3710, 0
  %v3850 = vsel %vm44, %v3711, 0
  %v3853 = vsel %vm44, %v3712, 0
  %v3856 = vsel %vm44, %v3713, 0
  %v3859 = vsel %vm44, %v3714, 0
  %v3862 = vsel %vm44, %v3715, 0
  %v3865 = vsel %vm44, %v3716, 0
  %v3868 = vsel %vm44, %v3717, 0
  %v3871 = vsel %vm44, %v3718, 0
  %v3874 = vsel %vm44, %v3719, 0
  %v3877 = vsel %vm44, %v3720, 0
  %v3880 = vsel %vm44, %v3721, 0
  %v3883 = vsel %vm44, %v3722, 0
  %v3886 = vsel %vm44, %v3723, 0
  %v3889 = vsel %vm44, %v3724, 0
  %v3892 = vsel %vm44, %v3725, 0
  %v3895 = vsel %vm44, %v3726, 0
  %v3898 = vsel %vm44, %v3727, 0
  %v3901 = vsel %vm44, %v3728, 0
  %v3904 = vsel %vm44, %v3729, 0
  %v3907 = vsel %vm44, %v3730, 0
  %v3910 = vsel %vm44, %v3731, 0
  %v3913 = vsel %vm44, %v3732, 0
  %v3916 = vsel %vm44, %v3733, 0
  %v3919 = vsel %vm44, %v3734, 0
  %v3922 = vsel %vm44, %v3735, 0
  %v3925 = vsel %vm44, %v3736, 0
  %v3928 = vsel %vm44, %v3737, 0
  %v3931 = vsel %vm581, %v31, 0
  %3933 = vmatprep.subr.mxu0 0.0
  %3934 = vmatpush1.msra.mxu0 %v3931
  %3935 = vmatprep.subr.mxu0 0.0
  %3936 = vmatpush1.msra.mxu0 0.0
  %3937 = vmatprep.subr.mxu0 0.0
  %3938 = vmatpush1.msra.mxu0 0.0
  %3939 = vmatprep.subr.mxu0 0.0
  %3940 = vmatpush1.msra.mxu0 0.0
  %3941 = vmatprep.subr.mxu0 0.0
  %3942 = vmatpush1.msra.mxu0 0.0
  %3943 = vmatprep.subr.mxu0 0.0
  %3944 = vmatpush1.msra.mxu0 0.0
  %3945 = vmatprep.subr.mxu0 0.0
  %3946 = vmatpush1.msra.mxu0 0.0
  %3947 = vmatprep.subr.mxu0 0.0
  %3948 = vmatpush1.msra.mxu0 0.0
  %3949 = vmatprep.subr.mxu0 0.0
  %3950 = vmatpush1.msra.mxu0 0.0
  %3951 = vmatprep.subr.mxu0 0.0
  %3952 = vmatpush1.msra.mxu0 0.0
  %3953 = vmatprep.subr.mxu0 0.0
  %3954 = vmatpush1.msra.mxu0 0.0
  %3955 = vmatprep.subr.mxu0 0.0
  %3956 = vmatpush1.msra.mxu0 0.0
  %3957 = vmatprep.subr.mxu0 0.0
  %3958 = vmatpush1.msra.mxu0 0.0
  %3959 = vmatprep.subr.mxu0 0.0
  %3960 = vmatpush1.msra.mxu0 0.0
  %3961 = vmatprep.subr.mxu0 0.0
  %3962 = vmatpush1.msra.mxu0 0.0
  %3963 = vmatprep.subr.mxu0 0.0
  %3964 = vmatpush1.msra.mxu0 0.0
  %3965 = vmatprep.subr.mxu0 0.0
  %3966 = vmatpush1.msra.mxu0 0.0
  %3967 = vmatprep.subr.mxu0 0.0
  %3968 = vmatpush1.msra.mxu0 0.0
  %3969 = vmatprep.subr.mxu0 0.0
  %3970 = vmatpush1.msra.mxu0 0.0
  %3971 = vmatprep.subr.mxu0 0.0
  %3972 = vmatpush1.msra.mxu0 0.0
  %3973 = vmatprep.subr.mxu0 0.0
  %3974 = vmatpush1.msra.mxu0 0.0
  %3975 = vmatprep.subr.mxu0 0.0
  %3976 = vmatpush1.msra.mxu0 0.0
  %3977 = vmatprep.subr.mxu0 0.0
  %3978 = vmatpush1.msra.mxu0 0.0
  %3979 = vmatprep.subr.mxu0 0.0
  %3980 = vmatpush1.msra.mxu0 0.0
  %3981 = vmatprep.subr.mxu0 0.0
  %3982 = vmatpush1.msra.mxu0 0.0
  %3983 = vmatprep.subr.mxu0 0.0
  %3984 = vmatpush1.msra.mxu0 0.0
  %3985 = vmatprep.subr.mxu0 0.0
  %3986 = vmatpush1.msra.mxu0 0.0
  %3987 = vmatprep.subr.mxu0 0.0
  %3988 = vmatpush1.msra.mxu0 0.0
  %3989 = vmatprep.subr.mxu0 0.0
  %3990 = vmatpush1.msra.mxu0 0.0
  %3991 = vmatprep.subr.mxu0 0.0
  %3992 = vmatpush1.msra.mxu0 0.0
  %3993 = vmatprep.subr.mxu0 0.0
  %3994 = vmatpush1.msra.mxu0 0.0
  %3995 = vmatprep.subr.mxu0 0.0
  %3996 = vmatpush1.msra.mxu0 0.0
  %3997 = vmatprep.mubr.f32.mxu0 0.0
  %3998 = vmatmul.mubr.f32.gmra.mrb[0].mxu0 %v3739
  %v3999 = vpop.f32.mrb[0].mxu0
  %v4000 = vadd.f32 0.0, %v3999
  %v4001 = vpop.f32.mrb[0].mxu0
  %4002 = vmatprep.mubr.f32.mxu0 0.0
  %4003 = vmatmul.mubr.f32.gmra.mrb[0].mxu0 %v3742
  %v4004 = vpop.f32.mrb[0].mxu0
  %v4005 = vadd.f32 0.0, %v4004
  %v4006 = vpop.f32.mrb[0].mxu0
  %4007 = vmatprep.mubr.f32.mxu0 0.0
  %4008 = vmatmul.mubr.f32.gmra.mrb[0].mxu0 %v3745
  %v4009 = vpop.f32.mrb[0].mxu0
  %v4010 = vadd.f32 0.0, %v4009
  %v4011 = vpop.f32.mrb[0].mxu0
  %4012 = vmatprep.mubr.f32.mxu0 0.0
  %4013 = vmatmul.mubr.f32.gmra.mrb[0].mxu0 %v3748
  %v4014 = vpop.f32.mrb[0].mxu0
  %v4015 = vadd.f32 0.0, %v4014
  %v4016 = vpop.f32.mrb[0].mxu0
  %4017 = vmatprep.mubr.f32.mxu0 0.0
  %4018 = vmatmul.mubr.f32.gmra.mrb[0].mxu0 %v3751
  %v4019 = vpop.f32.mrb[0].mxu0
  %v4020 = vadd.f32 0.0, %v4019
  %v4021 = vpop.f32.mrb[0].mxu0
  %4022 = vmatprep.mubr.f32.mxu0 0.0
  %4023 = vmatmul.mubr.f32.gmra.mrb[0].mxu0 %v3754
  %v4024 = vpop.f32.mrb[0].mxu0
  %v4025 = vadd.f32 0.0, %v4024
  %v4026 = vpop.f32.mrb[0].mxu0
  %4027 = vmatprep.mubr.f32.mxu0 0.0
  %4028 = vmatmul.mubr.f32.gmra.mrb[0].mxu0 %v3757
  %v4029 = vpop.f32.mrb[0].mxu0
  %v4030 = vadd.f32 0.0, %v4029
  %v4031 = vpop.f32.mrb[0].mxu0
  %4032 = vmatprep.mubr.f32.mxu0 0.0
  %4033 = vmatmul.mubr.f32.gmra.mrb[0].mxu0 %v3760
  %v4034 = vpop.f32.mrb[0].mxu0
  %v4035 = vadd.f32 0.0, %v4034
  %v4036 = vpop.f32.mrb[0].mxu0
  %4037 = vmatprep.mubr.f32.mxu0 0.0
  %4038 = vmatmul.mubr.f32.gmra.mrb[0].mxu0 %v3763
  %v4039 = vpop.f32.mrb[0].mxu0
  %v4040 = vadd.f32 0.0, %v4039
  %v4041 = vpop.f32.mrb[0].mxu0
  %4042 = vmatprep.mubr.f32.mxu0 0.0
  %4043 = vmatmul.mubr.f32.gmra.mrb[0].mxu0 %v3766
  %v4044 = vpop.f32.mrb[0].mxu0
  %v4045 = vadd.f32 0.0, %v4044
  %v4046 = vpop.f32.mrb[0].mxu0
  %4047 = vmatprep.mubr.f32.mxu0 0.0
  %4048 = vmatmul.mubr.f32.gmra.mrb[0].mxu0 %v3769
  %v4049 = vpop.f32.mrb[0].mxu0
  %v4050 = vadd.f32 0.0, %v4049
  %v4051 = vpop.f32.mrb[0].mxu0
  %4052 = vmatprep.mubr.f32.mxu0 0.0
  %4053 = vmatmul.mubr.f32.gmra.mrb[0].mxu0 %v3772
  %v4054 = vpop.f32.mrb[0].mxu0
  %v4055 = vadd.f32 0.0, %v4054
  %v4056 = vpop.f32.mrb[0].mxu0
  %4057 = vmatprep.mubr.f32.mxu0 0.0
  %4058 = vmatmul.mubr.f32.gmra.mrb[0].mxu0 %v3775
  %v4059 = vpop.f32.mrb[0].mxu0
  %v4060 = vadd.f32 0.0, %v4059
  %v4061 = vpop.f32.mrb[0].mxu0
  %4062 = vmatprep.mubr.f32.mxu0 0.0
  %4063 = vmatmul.mubr.f32.gmra.mrb[0].mxu0 %v3778
  %v4064 = vpop.f32.mrb[0].mxu0
  %v4065 = vadd.f32 0.0, %v4064
  %v4066 = vpop.f32.mrb[0].mxu0
  %4067 = vmatprep.mubr.f32.mxu0 0.0
  %4068 = vmatmul.mubr.f32.gmra.mrb[0].mxu0 %v3781
  %v4069 = vpop.f32.mrb[0].mxu0
  %v4070 = vadd.f32 0.0, %v4069
  %v4071 = vpop.f32.mrb[0].mxu0
  %4072 = vmatprep.mubr.f32.mxu0 0.0
  %4073 = vmatmul.mubr.f32.gmra.mrb[0].mxu0 %v3784
  %v4074 = vpop.f32.mrb[0].mxu0
  %v4075 = vadd.f32 0.0, %v4074
  %v4076 = vpop.f32.mrb[0].mxu0
  %4077 = vmatprep.mubr.f32.mxu0 0.0
  %4078 = vmatmul.mubr.f32.gmra.mrb[0].mxu0 %v3787
  %v4079 = vpop.f32.mrb[0].mxu0
  %v4080 = vadd.f32 0.0, %v4079
  %v4081 = vpop.f32.mrb[0].mxu0
  %4082 = vmatprep.mubr.f32.mxu0 0.0
  %4083 = vmatmul.mubr.f32.gmra.mrb[0].mxu0 %v3790
  %v4084 = vpop.f32.mrb[0].mxu0
  %v4085 = vadd.f32 0.0, %v4084
  %v4086 = vpop.f32.mrb[0].mxu0
  %4087 = vmatprep.mubr.f32.mxu0 0.0
  %4088 = vmatmul.mubr.f32.gmra.mrb[0].mxu0 %v3793
  %v4089 = vpop.f32.mrb[0].mxu0
  %v4090 = vadd.f32 0.0, %v4089
  %v4091 = vpop.f32.mrb[0].mxu0
  %4092 = vmatprep.mubr.f32.mxu0 0.0
  %4093 = vmatmul.mubr.f32.gmra.mrb[0].mxu0 %v3796
  %v4094 = vpop.f32.mrb[0].mxu0
  %v4095 = vadd.f32 0.0, %v4094
  %v4096 = vpop.f32.mrb[0].mxu0
  %4097 = vmatprep.mubr.f32.mxu0 0.0
  %4098 = vmatmul.mubr.f32.gmra.mrb[0].mxu0 %v3799
  %v4099 = vpop.f32.mrb[0].mxu0
  %v4100 = vadd.f32 0.0, %v4099
  %v4101 = vpop.f32.mrb[0].mxu0
  %4102 = vmatprep.mubr.f32.mxu0 0.0
  %4103 = vmatmul.mubr.f32.gmra.mrb[0].mxu0 %v3802
  %v4104 = vpop.f32.mrb[0].mxu0
  %v4105 = vadd.f32 0.0, %v4104
  %v4106 = vpop.f32.mrb[0].mxu0
  %4107 = vmatprep.mubr.f32.mxu0 0.0
  %4108 = vmatmul.mubr.f32.gmra.mrb[0].mxu0 %v3805
  %v4109 = vpop.f32.mrb[0].mxu0
  %v4110 = vadd.f32 0.0, %v4109
  %v4111 = vpop.f32.mrb[0].mxu0
  %4112 = vmatprep.mubr.f32.mxu0 0.0
  %4113 = vmatmul.mubr.f32.gmra.mrb[0].mxu0 %v3808
  %v4114 = vpop.f32.mrb[0].mxu0
  %v4115 = vadd.f32 0.0, %v4114
  %v4116 = vpop.f32.mrb[0].mxu0
  %4117 = vmatprep.mubr.f32.mxu0 0.0
  %4118 = vmatmul.mubr.f32.gmra.mrb[0].mxu0 %v3811
  %v4119 = vpop.f32.mrb[0].mxu0
  %v4120 = vadd.f32 0.0, %v4119
  %v4121 = vpop.f32.mrb[0].mxu0
  %4122 = vmatprep.mubr.f32.mxu0 0.0
  %4123 = vmatmul.mubr.f32.gmra.mrb[0].mxu0 %v3814
  %v4124 = vpop.f32.mrb[0].mxu0
  %v4125 = vadd.f32 0.0, %v4124
  %v4126 = vpop.f32.mrb[0].mxu0
  %4127 = vmatprep.mubr.f32.mxu0 0.0
  %4128 = vmatmul.mubr.f32.gmra.mrb[0].mxu0 %v3817
  %v4129 = vpop.f32.mrb[0].mxu0
  %v4130 = vadd.f32 0.0, %v4129
  %v4131 = vpop.f32.mrb[0].mxu0
  %4132 = vmatprep.mubr.f32.mxu0 0.0
  %4133 = vmatmul.mubr.f32.gmra.mrb[0].mxu0 %v3820
  %v4134 = vpop.f32.mrb[0].mxu0
  %v4135 = vadd.f32 0.0, %v4134
  %v4136 = vpop.f32.mrb[0].mxu0
  %4137 = vmatprep.mubr.f32.mxu0 0.0
  %4138 = vmatmul.mubr.f32.gmra.mrb[0].mxu0 %v3823
  %v4139 = vpop.f32.mrb[0].mxu0
  %v4140 = vadd.f32 0.0, %v4139
  %v4141 = vpop.f32.mrb[0].mxu0
  %4142 = vmatprep.mubr.f32.mxu0 0.0
  %4143 = vmatmul.mubr.f32.gmra.mrb[0].mxu0 %v3826
  %v4144 = vpop.f32.mrb[0].mxu0
  %v4145 = vadd.f32 0.0, %v4144
  %v4146 = vpop.f32.mrb[0].mxu0
  %4147 = vmatprep.mubr.f32.mxu0 0.0
  %4148 = vmatmul.mubr.f32.gmra.mrb[0].mxu0 %v3829
  %v4149 = vpop.f32.mrb[0].mxu0
  %v4150 = vadd.f32 0.0, %v4149
  %v4151 = vpop.f32.mrb[0].mxu0
  %4152 = vmatprep.mubr.f32.mxu0 0.0
  %4153 = vmatmul.mubr.f32.gmra.mrb[0].mxu0 %v3832
  %v4154 = vpop.f32.mrb[0].mxu0
  %v4155 = vadd.f32 0.0, %v4154
  %v4156 = vpop.f32.mrb[0].mxu0
  %4157 = vmatprep.mubr.f32.mxu0 0.0
  %4158 = vmatmul.mubr.f32.gmra.mrb[0].mxu0 %v3835
  %v4159 = vpop.f32.mrb[0].mxu0
  %v4160 = vadd.f32 0.0, %v4159
  %v4161 = vpop.f32.mrb[0].mxu0
  %4162 = vmatprep.mubr.f32.mxu0 0.0
  %4163 = vmatmul.mubr.f32.gmra.mrb[0].mxu0 %v3838
  %v4164 = vpop.f32.mrb[0].mxu0
  %v4165 = vadd.f32 0.0, %v4164
  %v4166 = vpop.f32.mrb[0].mxu0
  %4167 = vmatprep.mubr.f32.mxu0 0.0
  %4168 = vmatmul.mubr.f32.gmra.mrb[0].mxu0 %v3841
  %v4169 = vpop.f32.mrb[0].mxu0
  %v4170 = vadd.f32 0.0, %v4169
  %v4171 = vpop.f32.mrb[0].mxu0
  %4172 = vmatprep.mubr.f32.mxu0 0.0
  %4173 = vmatmul.mubr.f32.gmra.mrb[0].mxu0 %v3844
  %v4174 = vpop.f32.mrb[0].mxu0
  %v4175 = vadd.f32 0.0, %v4174
  %v4176 = vpop.f32.mrb[0].mxu0
  %4177 = vmatprep.mubr.f32.mxu0 0.0
  %4178 = vmatmul.mubr.f32.gmra.mrb[0].mxu0 %v3847
  %v4179 = vpop.f32.mrb[0].mxu0
  %v4180 = vadd.f32 0.0, %v4179
  %v4181 = vpop.f32.mrb[0].mxu0
  %4182 = vmatprep.mubr.f32.mxu0 0.0
  %4183 = vmatmul.mubr.f32.gmra.mrb[0].mxu0 %v3850
  %v4184 = vpop.f32.mrb[0].mxu0
  %v4185 = vadd.f32 0.0, %v4184
  %v4186 = vpop.f32.mrb[0].mxu0
  %4187 = vmatprep.mubr.f32.mxu0 0.0
  %4188 = vmatmul.mubr.f32.gmra.mrb[0].mxu0 %v3853
  %v4189 = vpop.f32.mrb[0].mxu0
  %v4190 = vadd.f32 0.0, %v4189
  %v4191 = vpop.f32.mrb[0].mxu0
  %4192 = vmatprep.mubr.f32.mxu0 0.0
  %4193 = vmatmul.mubr.f32.gmra.mrb[0].mxu0 %v3856
  %v4194 = vpop.f32.mrb[0].mxu0
  %v4195 = vadd.f32 0.0, %v4194
  %v4196 = vpop.f32.mrb[0].mxu0
  %4197 = vmatprep.mubr.f32.mxu0 0.0
  %4198 = vmatmul.mubr.f32.gmra.mrb[0].mxu0 %v3859
  %v4199 = vpop.f32.mrb[0].mxu0
  %v4200 = vadd.f32 0.0, %v4199
  %v4201 = vpop.f32.mrb[0].mxu0
  %4202 = vmatprep.mubr.f32.mxu0 0.0
  %4203 = vmatmul.mubr.f32.gmra.mrb[0].mxu0 %v3862
  %v4204 = vpop.f32.mrb[0].mxu0
  %v4205 = vadd.f32 0.0, %v4204
  %v4206 = vpop.f32.mrb[0].mxu0
  %4207 = vmatprep.mubr.f32.mxu0 0.0
  %4208 = vmatmul.mubr.f32.gmra.mrb[0].mxu0 %v3865
  %v4209 = vpop.f32.mrb[0].mxu0
  %v4210 = vadd.f32 0.0, %v4209
  %v4211 = vpop.f32.mrb[0].mxu0
  %4212 = vmatprep.mubr.f32.mxu0 0.0
  %4213 = vmatmul.mubr.f32.gmra.mrb[0].mxu0 %v3868
  %v4214 = vpop.f32.mrb[0].mxu0
  %v4215 = vadd.f32 0.0, %v4214
  %v4216 = vpop.f32.mrb[0].mxu0
  %4217 = vmatprep.mubr.f32.mxu0 0.0
  %4218 = vmatmul.mubr.f32.gmra.mrb[0].mxu0 %v3871
  %v4219 = vpop.f32.mrb[0].mxu0
  %v4220 = vadd.f32 0.0, %v4219
  %v4221 = vpop.f32.mrb[0].mxu0
  %4222 = vmatprep.mubr.f32.mxu0 0.0
  %4223 = vmatmul.mubr.f32.gmra.mrb[0].mxu0 %v3874
  %v4224 = vpop.f32.mrb[0].mxu0
  %v4225 = vadd.f32 0.0, %v4224
  %v4226 = vpop.f32.mrb[0].mxu0
  %4227 = vmatprep.mubr.f32.mxu0 0.0
  %4228 = vmatmul.mubr.f32.gmra.mrb[0].mxu0 %v3877
  %v4229 = vpop.f32.mrb[0].mxu0
  %v4230 = vadd.f32 0.0, %v4229
  %v4231 = vpop.f32.mrb[0].mxu0
  %4232 = vmatprep.mubr.f32.mxu0 0.0
  %4233 = vmatmul.mubr.f32.gmra.mrb[0].mxu0 %v3880
  %v4234 = vpop.f32.mrb[0].mxu0
  %v4235 = vadd.f32 0.0, %v4234
  %v4236 = vpop.f32.mrb[0].mxu0
  %4237 = vmatprep.mubr.f32.mxu0 0.0
  %4238 = vmatmul.mubr.f32.gmra.mrb[0].mxu0 %v3883
  %v4239 = vpop.f32.mrb[0].mxu0
  %v4240 = vadd.f32 0.0, %v4239
  %v4241 = vpop.f32.mrb[0].mxu0
  %4242 = vmatprep.mubr.f32.mxu0 0.0
  %4243 = vmatmul.mubr.f32.gmra.mrb[0].mxu0 %v3886
  %v4244 = vpop.f32.mrb[0].mxu0
  %v4245 = vadd.f32 0.0, %v4244
  %v4246 = vpop.f32.mrb[0].mxu0
  %4247 = vmatprep.mubr.f32.mxu0 0.0
  %4248 = vmatmul.mubr.f32.gmra.mrb[0].mxu0 %v3889
  %v4249 = vpop.f32.mrb[0].mxu0
  %v4250 = vadd.f32 0.0, %v4249
  %v4251 = vpop.f32.mrb[0].mxu0
  %4252 = vmatprep.mubr.f32.mxu0 0.0
  %4253 = vmatmul.mubr.f32.gmra.mrb[0].mxu0 %v3892
  %v4254 = vpop.f32.mrb[0].mxu0
  %v4255 = vadd.f32 0.0, %v4254
  %v4256 = vpop.f32.mrb[0].mxu0
  %4257 = vmatprep.mubr.f32.mxu0 0.0
  %4258 = vmatmul.mubr.f32.gmra.mrb[0].mxu0 %v3895
  %v4259 = vpop.f32.mrb[0].mxu0
  %v4260 = vadd.f32 0.0, %v4259
  %v4261 = vpop.f32.mrb[0].mxu0
  %4262 = vmatprep.mubr.f32.mxu0 0.0
  %4263 = vmatmul.mubr.f32.gmra.mrb[0].mxu0 %v3898
  %v4264 = vpop.f32.mrb[0].mxu0
  %v4265 = vadd.f32 0.0, %v4264
  %v4266 = vpop.f32.mrb[0].mxu0
  %4267 = vmatprep.mubr.f32.mxu0 0.0
  %4268 = vmatmul.mubr.f32.gmra.mrb[0].mxu0 %v3901
  %v4269 = vpop.f32.mrb[0].mxu0
  %v4270 = vadd.f32 0.0, %v4269
  %v4271 = vpop.f32.mrb[0].mxu0
  %4272 = vmatprep.mubr.f32.mxu0 0.0
  %4273 = vmatmul.mubr.f32.gmra.mrb[0].mxu0 %v3904
  %v4274 = vpop.f32.mrb[0].mxu0
  %v4275 = vadd.f32 0.0, %v4274
  %v4276 = vpop.f32.mrb[0].mxu0
  %4277 = vmatprep.mubr.f32.mxu0 0.0
  %4278 = vmatmul.mubr.f32.gmra.mrb[0].mxu0 %v3907
  %v4279 = vpop.f32.mrb[0].mxu0
  %v4280 = vadd.f32 0.0, %v4279
  %v4281 = vpop.f32.mrb[0].mxu0
  %4282 = vmatprep.mubr.f32.mxu0 0.0
  %4283 = vmatmul.mubr.f32.gmra.mrb[0].mxu0 %v3910
  %v4284 = vpop.f32.mrb[0].mxu0
  %v4285 = vadd.f32 0.0, %v4284
  %v4286 = vpop.f32.mrb[0].mxu0
  %4287 = vmatprep.mubr.f32.mxu0 0.0
  %4288 = vmatmul.mubr.f32.gmra.mrb[0].mxu0 %v3913
  %v4289 = vpop.f32.mrb[0].mxu0
  %v4290 = vadd.f32 0.0, %v4289
  %v4291 = vpop.f32.mrb[0].mxu0
  %4292 = vmatprep.mubr.f32.mxu0 0.0
  %4293 = vmatmul.mubr.f32.gmra.mrb[0].mxu0 %v3916
  %v4294 = vpop.f32.mrb[0].mxu0
  %v4295 = vadd.f32 0.0, %v4294
  %v4296 = vpop.f32.mrb[0].mxu0
  %4297 = vmatprep.mubr.f32.mxu0 0.0
  %4298 = vmatmul.mubr.f32.gmra.mrb[0].mxu0 %v3919
  %v4299 = vpop.f32.mrb[0].mxu0
  %v4300 = vadd.f32 0.0, %v4299
  %v4301 = vpop.f32.mrb[0].mxu0
  %4302 = vmatprep.mubr.f32.mxu0 0.0
  %4303 = vmatmul.mubr.f32.gmra.mrb[0].mxu0 %v3922
  %v4304 = vpop.f32.mrb[0].mxu0
  %v4305 = vadd.f32 0.0, %v4304
  %v4306 = vpop.f32.mrb[0].mxu0
  %4307 = vmatprep.mubr.f32.mxu0 0.0
  %4308 = vmatmul.mubr.f32.gmra.mrb[0].mxu0 %v3925
  %v4309 = vpop.f32.mrb[0].mxu0
  %v4310 = vadd.f32 0.0, %v4309
  %v4311 = vpop.f32.mrb[0].mxu0
  %4312 = vmatprep.mubr.f32.mxu0 0.0
  %4313 = vmatmul.mubr.f32.gmra.mrb[0].mxu0 %v3928
  %v4314 = vpop.f32.mrb[0].mxu0
  %v4315 = vadd.f32 0.0, %v4314
  %v4316 = vpop.f32.mrb[0].mxu0
  %4317 = vdwg.mxu0
  %v4318 = vadd.f32 %v3610, %v4000
  %v4319 = vadd.f32 %v3611, %v4005
  %v4320 = vadd.f32 %v3612, %v4010
  %v4321 = vadd.f32 %v3613, %v4015
  %v4322 = vadd.f32 %v3614, %v4020
  %v4323 = vadd.f32 %v3615, %v4025
  %v4324 = vadd.f32 %v3616, %v4030
  %v4325 = vadd.f32 %v3617, %v4035
  %v4326 = vadd.f32 %v3618, %v4040
  %v4327 = vadd.f32 %v3619, %v4045
  %v4328 = vadd.f32 %v3620, %v4050
  %v4329 = vadd.f32 %v3621, %v4055
  %v4330 = vadd.f32 %v3622, %v4060
  %v4331 = vadd.f32 %v3623, %v4065
  %v4332 = vadd.f32 %v3624, %v4070
  %v4333 = vadd.f32 %v3625, %v4075
  %v4334 = vadd.f32 %v3626, %v4080
  %v4335 = vadd.f32 %v3627, %v4085
  %v4336 = vadd.f32 %v3628, %v4090
  %v4337 = vadd.f32 %v3629, %v4095
  %v4338 = vadd.f32 %v3630, %v4100
  %v4339 = vadd.f32 %v3631, %v4105
  %v4340 = vadd.f32 %v3632, %v4110
  %v4341 = vadd.f32 %v3633, %v4115
  %v4342 = vadd.f32 %v3634, %v4120
  %v4343 = vadd.f32 %v3635, %v4125
  %v4344 = vadd.f32 %v3636, %v4130
  %v4345 = vadd.f32 %v3637, %v4135
  %v4346 = vadd.f32 %v3638, %v4140
  %v4347 = vadd.f32 %v3639, %v4145
  %v4348 = vadd.f32 %v3640, %v4150
  %v4349 = vadd.f32 %v3641, %v4155
  %v4350 = vadd.f32 %v3642, %v4160
  %v4351 = vadd.f32 %v3643, %v4165
  %v4352 = vadd.f32 %v3644, %v4170
  %v4353 = vadd.f32 %v3645, %v4175
  %v4354 = vadd.f32 %v3646, %v4180
  %v4355 = vadd.f32 %v3647, %v4185
  %v4356 = vadd.f32 %v3648, %v4190
  %v4357 = vadd.f32 %v3649, %v4195
  %v4358 = vadd.f32 %v3650, %v4200
  %v4359 = vadd.f32 %v3651, %v4205
  %v4360 = vadd.f32 %v3652, %v4210
  %v4361 = vadd.f32 %v3653, %v4215
  %v4362 = vadd.f32 %v3654, %v4220
  %v4363 = vadd.f32 %v3655, %v4225
  %v4364 = vadd.f32 %v3656, %v4230
  %v4365 = vadd.f32 %v3657, %v4235
  %v4366 = vadd.f32 %v3658, %v4240
  %v4367 = vadd.f32 %v3659, %v4245
  %v4368 = vadd.f32 %v3660, %v4250
  %v4369 = vadd.f32 %v3661, %v4255
  %v4370 = vadd.f32 %v3662, %v4260
  %v4371 = vadd.f32 %v3663, %v4265
  %v4372 = vadd.f32 %v3664, %v4270
  %v4373 = vadd.f32 %v3665, %v4275
  %v4374 = vadd.f32 %v3666, %v4280
  %v4375 = vadd.f32 %v3667, %v4285
  %v4376 = vadd.f32 %v3668, %v4290
  %v4377 = vadd.f32 %v3669, %v4295
  %v4378 = vadd.f32 %v3670, %v4300
  %v4379 = vadd.f32 %v3671, %v4305
  %v4380 = vadd.f32 %v3672, %v4310
  %v4381 = vadd.f32 %v3673, %v4315
  %s4382 = scalar_lea.vmem [#allocation2], 48
  %v4383 = vld [vmem:[%s4382] sm:$0xff]
  %v4384 = vld [vmem:[%s4382 + $0x8] sm:$0xff]
  %v4385 = vld [vmem:[%s4382 + $0x18] sm:$0xff]
  %v4386 = vld [vmem:[%s4382 + $0x20] sm:$0xff]
  %v4387 = vld [vmem:[%s4382 + $0x30] sm:$0xff]
  %v4388 = vld [vmem:[%s4382 + $0x38] sm:$0xff]
  %v4389 = vld [vmem:[%s4382 + $0x48] sm:$0xff]
  %v4390 = vld [vmem:[%s4382 + $0x50] sm:$0xff]
  %v4391 = vld [vmem:[%s4382 + $0x60] sm:$0xff]
  %v4392 = vld [vmem:[%s4382 + $0x68] sm:$0xff]
  %v4393 = vld [vmem:[%s4382 + $0x78] sm:$0xff]
  %v4394 = vld [vmem:[%s4382 + $0x80] sm:$0xff]
  %v4395 = vld [vmem:[%s4382 + $0x90] sm:$0xff]
  %v4396 = vld [vmem:[%s4382 + $0x98] sm:$0xff]
  %v4397 = vld [vmem:[%s4382 + $0xa8] sm:$0xff]
  %v4398 = vld [vmem:[%s4382 + $0xb0] sm:$0xff]
  %v4399 = vld [vmem:[%s4382 + $0xc0] sm:$0xff]
  %v4400 = vld [vmem:[%s4382 + $0xc8] sm:$0xff]
  %v4401 = vld [vmem:[%s4382 + $0xd8] sm:$0xff]
  %v4402 = vld [vmem:[%s4382 + $0xe0] sm:$0xff]
  %v4403 = vld [vmem:[%s4382 + $0xf0] sm:$0xff]
  %v4404 = vld [vmem:[%s4382 + $0xf8] sm:$0xff]
  %v4405 = vld [vmem:[%s4382 + $0x108] sm:$0xff]
  %v4406 = vld [vmem:[%s4382 + $0x110] sm:$0xff]
  %v4407 = vld [vmem:[%s4382 + $0x120] sm:$0xff]
  %v4408 = vld [vmem:[%s4382 + $0x128] sm:$0xff]
  %v4409 = vld [vmem:[%s4382 + $0x138] sm:$0xff]
  %v4410 = vld [vmem:[%s4382 + $0x140] sm:$0xff]
  %v4411 = vld [vmem:[%s4382 + $0x150] sm:$0xff]
  %v4412 = vld [vmem:[%s4382 + $0x158] sm:$0xff]
  %v4413 = vld [vmem:[%s4382 + $0x168] sm:$0xff]
  %v4414 = vld [vmem:[%s4382 + $0x170] sm:$0xff]
  %v4415 = vld [vmem:[%s4382 + $0x1b0] sm:$0xff]
  %v4416 = vld [vmem:[%s4382 + $0x1b8] sm:$0xff]
  %v4417 = vld [vmem:[%s4382 + $0x1c8] sm:$0xff]
  %v4418 = vld [vmem:[%s4382 + $0x1d0] sm:$0xff]
  %v4419 = vld [vmem:[%s4382 + $0x1e0] sm:$0xff]
  %v4420 = vld [vmem:[%s4382 + $0x1e8] sm:$0xff]
  %v4421 = vld [vmem:[%s4382 + $0x1f8] sm:$0xff]
  %v4422 = vld [vmem:[%s4382 + $0x200] sm:$0xff]
  %v4423 = vld [vmem:[%s4382 + $0x210] sm:$0xff]
  %v4424 = vld [vmem:[%s4382 + $0x218] sm:$0xff]
  %v4425 = vld [vmem:[%s4382 + $0x228] sm:$0xff]
  %v4426 = vld [vmem:[%s4382 + $0x230] sm:$0xff]
  %v4427 = vld [vmem:[%s4382 + $0x240] sm:$0xff]
  %v4428 = vld [vmem:[%s4382 + $0x248] sm:$0xff]
  %v4429 = vld [vmem:[%s4382 + $0x258] sm:$0xff]
  %v4430 = vld [vmem:[%s4382 + $0x260] sm:$0xff]
  %v4431 = vld [vmem:[%s4382 + $0x270] sm:$0xff]
  %v4432 = vld [vmem:[%s4382 + $0x278] sm:$0xff]
  %v4433 = vld [vmem:[%s4382 + $0x288] sm:$0xff]
  %v4434 = vld [vmem:[%s4382 + $0x290] sm:$0xff]
  %v4435 = vld [vmem:[%s4382 + $0x2a0] sm:$0xff]
  %v4436 = vld [vmem:[%s4382 + $0x2a8] sm:$0xff]
  %v4437 = vld [vmem:[%s4382 + $0x2b8] sm:$0xff]
  %v4438 = vld [vmem:[%s4382 + $0x2c0] sm:$0xff]
  %v4439 = vld [vmem:[%s4382 + $0x2d0] sm:$0xff]
  %v4440 = vld [vmem:[%s4382 + $0x2d8] sm:$0xff]
  %v4441 = vld [vmem:[%s4382 + $0x2e8] sm:$0xff]
  %v4442 = vld [vmem:[%s4382 + $0x2f0] sm:$0xff]
  %v4443 = vld [vmem:[%s4382 + $0x300] sm:$0xff]
  %v4444 = vld [vmem:[%s4382 + $0x308] sm:$0xff]
  %v4445 = vld [vmem:[%s4382 + $0x318] sm:$0xff]
  %v4446 = vld [vmem:[%s4382 + $0x320] sm:$0xff]
  %v4448 = vsel %vm44, %v4383, 0
  %v4451 = vsel %vm44, %v4384, 0
  %v4454 = vsel %vm44, %v4385, 0
  %v4457 = vsel %vm44, %v4386, 0
  %v4460 = vsel %vm44, %v4387, 0
  %v4463 = vsel %vm44, %v4388, 0
  %v4466 = vsel %vm44, %v4389, 0
  %v4469 = vsel %vm44, %v4390, 0
  %v4472 = vsel %vm44, %v4391, 0
  %v4475 = vsel %vm44, %v4392, 0
  %v4478 = vsel %vm44, %v4393, 0
  %v4481 = vsel %vm44, %v4394, 0
  %v4484 = vsel %vm44, %v4395, 0
  %v4487 = vsel %vm44, %v4396, 0
  %v4490 = vsel %vm44, %v4397, 0
  %v4493 = vsel %vm44, %v4398, 0
  %v4496 = vsel %vm44, %v4399, 0
  %v4499 = vsel %vm44, %v4400, 0
  %v4502 = vsel %vm44, %v4401, 0
  %v4505 = vsel %vm44, %v4402, 0
  %v4508 = vsel %vm44, %v4403, 0
  %v4511 = vsel %vm44, %v4404, 0
  %v4514 = vsel %vm44, %v4405, 0
  %v4517 = vsel %vm44, %v4406, 0
  %v4520 = vsel %vm44, %v4407, 0
  %v4523 = vsel %vm44, %v4408, 0
  %v4526 = vsel %vm44, %v4409, 0
  %v4529 = vsel %vm44, %v4410, 0
  %v4532 = vsel %vm44, %v4411, 0
  %v4535 = vsel %vm44, %v4412, 0
  %v4538 = vsel %vm44, %v4413, 0
  %v4541 = vsel %vm44, %v4414, 0
  %v4544 = vsel %vm44, %v4415, 0
  %v4547 = vsel %vm44, %v4416, 0
  %v4550 = vsel %vm44, %v4417, 0
  %v4553 = vsel %vm44, %v4418, 0
  %v4556 = vsel %vm44, %v4419, 0
  %v4559 = vsel %vm44, %v4420, 0
  %v4562 = vsel %vm44, %v4421, 0
  %v4565 = vsel %vm44, %v4422, 0
  %v4568 = vsel %vm44, %v4423, 0
  %v4571 = vsel %vm44, %v4424, 0
  %v4574 = vsel %vm44, %v4425, 0
  %v4577 = vsel %vm44, %v4426, 0
  %v4580 = vsel %vm44, %v4427, 0
  %v4583 = vsel %vm44, %v4428, 0
  %v4586 = vsel %vm44, %v4429, 0
  %v4589 = vsel %vm44, %v4430, 0
  %v4592 = vsel %vm44, %v4431, 0
  %v4595 = vsel %vm44, %v4432, 0
  %v4598 = vsel %vm44, %v4433, 0
  %v4601 = vsel %vm44, %v4434, 0
  %v4604 = vsel %vm44, %v4435, 0
  %v4607 = vsel %vm44, %v4436, 0
  %v4610 = vsel %vm44, %v4437, 0
  %v4613 = vsel %vm44, %v4438, 0
  %v4616 = vsel %vm44, %v4439, 0
  %v4619 = vsel %vm44, %v4440, 0
  %v4622 = vsel %vm44, %v4441, 0
  %v4625 = vsel %vm44, %v4442, 0
  %v4628 = vsel %vm44, %v4443, 0
  %v4631 = vsel %vm44, %v4444, 0
  %v4634 = vsel %vm44, %v4445, 0
  %v4637 = vsel %vm44, %v4446, 0
  %v4640 = vsel %vm581, %v32, 0
  %4642 = vmatprep.subr.mxu0 0.0
  %4643 = vmatpush1.msra.mxu0 %v4640
  %4644 = vmatprep.subr.mxu0 0.0
  %4645 = vmatpush1.msra.mxu0 0.0
  %4646 = vmatprep.subr.mxu0 0.0
  %4647 = vmatpush1.msra.mxu0 0.0
  %4648 = vmatprep.subr.mxu0 0.0
  %4649 = vmatpush1.msra.mxu0 0.0
  %4650 = vmatprep.subr.mxu0 0.0
  %4651 = vmatpush1.msra.mxu0 0.0
  %4652 = vmatprep.subr.mxu0 0.0
  %4653 = vmatpush1.msra.mxu0 0.0
  %4654 = vmatprep.subr.mxu0 0.0
  %4655 = vmatpush1.msra.mxu0 0.0
  %4656 = vmatprep.subr.mxu0 0.0
  %4657 = vmatpush1.msra.mxu0 0.0
  %4658 = vmatprep.subr.mxu0 0.0
  %4659 = vmatpush1.msra.mxu0 0.0
  %4660 = vmatprep.subr.mxu0 0.0
  %4661 = vmatpush1.msra.mxu0 0.0
  %4662 = vmatprep.subr.mxu0 0.0
  %4663 = vmatpush1.msra.mxu0 0.0
  %4664 = vmatprep.subr.mxu0 0.0
  %4665 = vmatpush1.msra.mxu0 0.0
  %4666 = vmatprep.subr.mxu0 0.0
  %4667 = vmatpush1.msra.mxu0 0.0
  %4668 = vmatprep.subr.mxu0 0.0
  %4669 = vmatpush1.msra.mxu0 0.0
  %4670 = vmatprep.subr.mxu0 0.0
  %4671 = vmatpush1.msra.mxu0 0.0
  %4672 = vmatprep.subr.mxu0 0.0
  %4673 = vmatpush1.msra.mxu0 0.0
  %4674 = vmatprep.subr.mxu0 0.0
  %4675 = vmatpush1.msra.mxu0 0.0
  %4676 = vmatprep.subr.mxu0 0.0
  %4677 = vmatpush1.msra.mxu0 0.0
  %4678 = vmatprep.subr.mxu0 0.0
  %4679 = vmatpush1.msra.mxu0 0.0
  %4680 = vmatprep.subr.mxu0 0.0
  %4681 = vmatpush1.msra.mxu0 0.0
  %4682 = vmatprep.subr.mxu0 0.0
  %4683 = vmatpush1.msra.mxu0 0.0
  %4684 = vmatprep.subr.mxu0 0.0
  %4685 = vmatpush1.msra.mxu0 0.0
  %4686 = vmatprep.subr.mxu0 0.0
  %4687 = vmatpush1.msra.mxu0 0.0
  %4688 = vmatprep.subr.mxu0 0.0
  %4689 = vmatpush1.msra.mxu0 0.0
  %4690 = vmatprep.subr.mxu0 0.0
  %4691 = vmatpush1.msra.mxu0 0.0
  %4692 = vmatprep.subr.mxu0 0.0
  %4693 = vmatpush1.msra.mxu0 0.0
  %4694 = vmatprep.subr.mxu0 0.0
  %4695 = vmatpush1.msra.mxu0 0.0
  %4696 = vmatprep.subr.mxu0 0.0
  %4697 = vmatpush1.msra.mxu0 0.0
  %4698 = vmatprep.subr.mxu0 0.0
  %4699 = vmatpush1.msra.mxu0 0.0
  %4700 = vmatprep.subr.mxu0 0.0
  %4701 = vmatpush1.msra.mxu0 0.0
  %4702 = vmatprep.subr.mxu0 0.0
  %4703 = vmatpush1.msra.mxu0 0.0
  %4704 = vmatprep.subr.mxu0 0.0
  %4705 = vmatpush1.msra.mxu0 0.0
  %4706 = vmatprep.mubr.f32.mxu0 0.0
  %4707 = vmatmul.mubr.f32.gmra.mrb[0].mxu0 %v4448
  %v4708 = vpop.f32.mrb[0].mxu0
  %v4709 = vadd.f32 0.0, %v4708
  %v4710 = vpop.f32.mrb[0].mxu0
  %4711 = vmatprep.mubr.f32.mxu0 0.0
  %4712 = vmatmul.mubr.f32.gmra.mrb[0].mxu0 %v4451
  %v4713 = vpop.f32.mrb[0].mxu0
  %v4714 = vadd.f32 0.0, %v4713
  %v4715 = vpop.f32.mrb[0].mxu0
  %4716 = vmatprep.mubr.f32.mxu0 0.0
  %4717 = vmatmul.mubr.f32.gmra.mrb[0].mxu0 %v4454
  %v4718 = vpop.f32.mrb[0].mxu0
  %v4719 = vadd.f32 0.0, %v4718
  %v4720 = vpop.f32.mrb[0].mxu0
  %4721 = vmatprep.mubr.f32.mxu0 0.0
  %4722 = vmatmul.mubr.f32.gmra.mrb[0].mxu0 %v4457
  %v4723 = vpop.f32.mrb[0].mxu0
  %v4724 = vadd.f32 0.0, %v4723
  %v4725 = vpop.f32.mrb[0].mxu0
  %4726 = vmatprep.mubr.f32.mxu0 0.0
  %4727 = vmatmul.mubr.f32.gmra.mrb[0].mxu0 %v4460
  %v4728 = vpop.f32.mrb[0].mxu0
  %v4729 = vadd.f32 0.0, %v4728
  %v4730 = vpop.f32.mrb[0].mxu0
  %4731 = vmatprep.mubr.f32.mxu0 0.0
  %4732 = vmatmul.mubr.f32.gmra.mrb[0].mxu0 %v4463
  %v4733 = vpop.f32.mrb[0].mxu0
  %v4734 = vadd.f32 0.0, %v4733
  %v4735 = vpop.f32.mrb[0].mxu0
  %4736 = vmatprep.mubr.f32.mxu0 0.0
  %4737 = vmatmul.mubr.f32.gmra.mrb[0].mxu0 %v4466
  %v4738 = vpop.f32.mrb[0].mxu0
  %v4739 = vadd.f32 0.0, %v4738
  %v4740 = vpop.f32.mrb[0].mxu0
  %4741 = vmatprep.mubr.f32.mxu0 0.0
  %4742 = vmatmul.mubr.f32.gmra.mrb[0].mxu0 %v4469
  %v4743 = vpop.f32.mrb[0].mxu0
  %v4744 = vadd.f32 0.0, %v4743
  %v4745 = vpop.f32.mrb[0].mxu0
  %4746 = vmatprep.mubr.f32.mxu0 0.0
  %4747 = vmatmul.mubr.f32.gmra.mrb[0].mxu0 %v4472
  %v4748 = vpop.f32.mrb[0].mxu0
  %v4749 = vadd.f32 0.0, %v4748
  %v4750 = vpop.f32.mrb[0].mxu0
  %4751 = vmatprep.mubr.f32.mxu0 0.0
  %4752 = vmatmul.mubr.f32.gmra.mrb[0].mxu0 %v4475
  %v4753 = vpop.f32.mrb[0].mxu0
  %v4754 = vadd.f32 0.0, %v4753
  %v4755 = vpop.f32.mrb[0].mxu0
  %4756 = vmatprep.mubr.f32.mxu0 0.0
  %4757 = vmatmul.mubr.f32.gmra.mrb[0].mxu0 %v4478
  %v4758 = vpop.f32.mrb[0].mxu0
  %v4759 = vadd.f32 0.0, %v4758
  %v4760 = vpop.f32.mrb[0].mxu0
  %4761 = vmatprep.mubr.f32.mxu0 0.0
  %4762 = vmatmul.mubr.f32.gmra.mrb[0].mxu0 %v4481
  %v4763 = vpop.f32.mrb[0].mxu0
  %v4764 = vadd.f32 0.0, %v4763
  %v4765 = vpop.f32.mrb[0].mxu0
  %4766 = vmatprep.mubr.f32.mxu0 0.0
  %4767 = vmatmul.mubr.f32.gmra.mrb[0].mxu0 %v4484
  %v4768 = vpop.f32.mrb[0].mxu0
  %v4769 = vadd.f32 0.0, %v4768
  %v4770 = vpop.f32.mrb[0].mxu0
  %4771 = vmatprep.mubr.f32.mxu0 0.0
  %4772 = vmatmul.mubr.f32.gmra.mrb[0].mxu0 %v4487
  %v4773 = vpop.f32.mrb[0].mxu0
  %v4774 = vadd.f32 0.0, %v4773
  %v4775 = vpop.f32.mrb[0].mxu0
  %4776 = vmatprep.mubr.f32.mxu0 0.0
  %4777 = vmatmul.mubr.f32.gmra.mrb[0].mxu0 %v4490
  %v4778 = vpop.f32.mrb[0].mxu0
  %v4779 = vadd.f32 0.0, %v4778
  %v4780 = vpop.f32.mrb[0].mxu0
  %4781 = vmatprep.mubr.f32.mxu0 0.0
  %4782 = vmatmul.mubr.f32.gmra.mrb[0].mxu0 %v4493
  %v4783 = vpop.f32.mrb[0].mxu0
  %v4784 = vadd.f32 0.0, %v4783
  %v4785 = vpop.f32.mrb[0].mxu0
  %4786 = vmatprep.mubr.f32.mxu0 0.0
  %4787 = vmatmul.mubr.f32.gmra.mrb[0].mxu0 %v4496
  %v4788 = vpop.f32.mrb[0].mxu0
  %v4789 = vadd.f32 0.0, %v4788
  %v4790 = vpop.f32.mrb[0].mxu0
  %4791 = vmatprep.mubr.f32.mxu0 0.0
  %4792 = vmatmul.mubr.f32.gmra.mrb[0].mxu0 %v4499
  %v4793 = vpop.f32.mrb[0].mxu0
  %v4794 = vadd.f32 0.0, %v4793
  %v4795 = vpop.f32.mrb[0].mxu0
  %4796 = vmatprep.mubr.f32.mxu0 0.0
  %4797 = vmatmul.mubr.f32.gmra.mrb[0].mxu0 %v4502
  %v4798 = vpop.f32.mrb[0].mxu0
  %v4799 = vadd.f32 0.0, %v4798
  %v4800 = vpop.f32.mrb[0].mxu0
  %4801 = vmatprep.mubr.f32.mxu0 0.0
  %4802 = vmatmul.mubr.f32.gmra.mrb[0].mxu0 %v4505
  %v4803 = vpop.f32.mrb[0].mxu0
  %v4804 = vadd.f32 0.0, %v4803
  %v4805 = vpop.f32.mrb[0].mxu0
  %4806 = vmatprep.mubr.f32.mxu0 0.0
  %4807 = vmatmul.mubr.f32.gmra.mrb[0].mxu0 %v4508
  %v4808 = vpop.f32.mrb[0].mxu0
  %v4809 = vadd.f32 0.0, %v4808
  %v4810 = vpop.f32.mrb[0].mxu0
  %4811 = vmatprep.mubr.f32.mxu0 0.0
  %4812 = vmatmul.mubr.f32.gmra.mrb[0].mxu0 %v4511
  %v4813 = vpop.f32.mrb[0].mxu0
  %v4814 = vadd.f32 0.0, %v4813
  %v4815 = vpop.f32.mrb[0].mxu0
  %4816 = vmatprep.mubr.f32.mxu0 0.0
  %4817 = vmatmul.mubr.f32.gmra.mrb[0].mxu0 %v4514
  %v4818 = vpop.f32.mrb[0].mxu0
  %v4819 = vadd.f32 0.0, %v4818
  %v4820 = vpop.f32.mrb[0].mxu0
  %4821 = vmatprep.mubr.f32.mxu0 0.0
  %4822 = vmatmul.mubr.f32.gmra.mrb[0].mxu0 %v4517
  %v4823 = vpop.f32.mrb[0].mxu0
  %v4824 = vadd.f32 0.0, %v4823
  %v4825 = vpop.f32.mrb[0].mxu0
  %4826 = vmatprep.mubr.f32.mxu0 0.0
  %4827 = vmatmul.mubr.f32.gmra.mrb[0].mxu0 %v4520
  %v4828 = vpop.f32.mrb[0].mxu0
  %v4829 = vadd.f32 0.0, %v4828
  %v4830 = vpop.f32.mrb[0].mxu0
  %4831 = vmatprep.mubr.f32.mxu0 0.0
  %4832 = vmatmul.mubr.f32.gmra.mrb[0].mxu0 %v4523
  %v4833 = vpop.f32.mrb[0].mxu0
  %v4834 = vadd.f32 0.0, %v4833
  %v4835 = vpop.f32.mrb[0].mxu0
  %4836 = vmatprep.mubr.f32.mxu0 0.0
  %4837 = vmatmul.mubr.f32.gmra.mrb[0].mxu0 %v4526
  %v4838 = vpop.f32.mrb[0].mxu0
  %v4839 = vadd.f32 0.0, %v4838
  %v4840 = vpop.f32.mrb[0].mxu0
  %4841 = vmatprep.mubr.f32.mxu0 0.0
  %4842 = vmatmul.mubr.f32.gmra.mrb[0].mxu0 %v4529
  %v4843 = vpop.f32.mrb[0].mxu0
  %v4844 = vadd.f32 0.0, %v4843
  %v4845 = vpop.f32.mrb[0].mxu0
  %4846 = vmatprep.mubr.f32.mxu0 0.0
  %4847 = vmatmul.mubr.f32.gmra.mrb[0].mxu0 %v4532
  %v4848 = vpop.f32.mrb[0].mxu0
  %v4849 = vadd.f32 0.0, %v4848
  %v4850 = vpop.f32.mrb[0].mxu0
  %4851 = vmatprep.mubr.f32.mxu0 0.0
  %4852 = vmatmul.mubr.f32.gmra.mrb[0].mxu0 %v4535
  %v4853 = vpop.f32.mrb[0].mxu0
  %v4854 = vadd.f32 0.0, %v4853
  %v4855 = vpop.f32.mrb[0].mxu0
  %4856 = vmatprep.mubr.f32.mxu0 0.0
  %4857 = vmatmul.mubr.f32.gmra.mrb[0].mxu0 %v4538
  %v4858 = vpop.f32.mrb[0].mxu0
  %v4859 = vadd.f32 0.0, %v4858
  %v4860 = vpop.f32.mrb[0].mxu0
  %4861 = vmatprep.mubr.f32.mxu0 0.0
  %4862 = vmatmul.mubr.f32.gmra.mrb[0].mxu0 %v4541
  %v4863 = vpop.f32.mrb[0].mxu0
  %v4864 = vadd.f32 0.0, %v4863
  %v4865 = vpop.f32.mrb[0].mxu0
  %4866 = vmatprep.mubr.f32.mxu0 0.0
  %4867 = vmatmul.mubr.f32.gmra.mrb[0].mxu0 %v4544
  %v4868 = vpop.f32.mrb[0].mxu0
  %v4869 = vadd.f32 0.0, %v4868
  %v4870 = vpop.f32.mrb[0].mxu0
  %4871 = vmatprep.mubr.f32.mxu0 0.0
  %4872 = vmatmul.mubr.f32.gmra.mrb[0].mxu0 %v4547
  %v4873 = vpop.f32.mrb[0].mxu0
  %v4874 = vadd.f32 0.0, %v4873
  %v4875 = vpop.f32.mrb[0].mxu0
  %4876 = vmatprep.mubr.f32.mxu0 0.0
  %4877 = vmatmul.mubr.f32.gmra.mrb[0].mxu0 %v4550
  %v4878 = vpop.f32.mrb[0].mxu0
  %v4879 = vadd.f32 0.0, %v4878
  %v4880 = vpop.f32.mrb[0].mxu0
  %4881 = vmatprep.mubr.f32.mxu0 0.0
  %4882 = vmatmul.mubr.f32.gmra.mrb[0].mxu0 %v4553
  %v4883 = vpop.f32.mrb[0].mxu0
  %v4884 = vadd.f32 0.0, %v4883
  %v4885 = vpop.f32.mrb[0].mxu0
  %4886 = vmatprep.mubr.f32.mxu0 0.0
  %4887 = vmatmul.mubr.f32.gmra.mrb[0].mxu0 %v4556
  %v4888 = vpop.f32.mrb[0].mxu0
  %v4889 = vadd.f32 0.0, %v4888
  %v4890 = vpop.f32.mrb[0].mxu0
  %4891 = vmatprep.mubr.f32.mxu0 0.0
  %4892 = vmatmul.mubr.f32.gmra.mrb[0].mxu0 %v4559
  %v4893 = vpop.f32.mrb[0].mxu0
  %v4894 = vadd.f32 0.0, %v4893
  %v4895 = vpop.f32.mrb[0].mxu0
  %4896 = vmatprep.mubr.f32.mxu0 0.0
  %4897 = vmatmul.mubr.f32.gmra.mrb[0].mxu0 %v4562
  %v4898 = vpop.f32.mrb[0].mxu0
  %v4899 = vadd.f32 0.0, %v4898
  %v4900 = vpop.f32.mrb[0].mxu0
  %4901 = vmatprep.mubr.f32.mxu0 0.0
  %4902 = vmatmul.mubr.f32.gmra.mrb[0].mxu0 %v4565
  %v4903 = vpop.f32.mrb[0].mxu0
  %v4904 = vadd.f32 0.0, %v4903
  %v4905 = vpop.f32.mrb[0].mxu0
  %4906 = vmatprep.mubr.f32.mxu0 0.0
  %4907 = vmatmul.mubr.f32.gmra.mrb[0].mxu0 %v4568
  %v4908 = vpop.f32.mrb[0].mxu0
  %v4909 = vadd.f32 0.0, %v4908
  %v4910 = vpop.f32.mrb[0].mxu0
  %4911 = vmatprep.mubr.f32.mxu0 0.0
  %4912 = vmatmul.mubr.f32.gmra.mrb[0].mxu0 %v4571
  %v4913 = vpop.f32.mrb[0].mxu0
  %v4914 = vadd.f32 0.0, %v4913
  %v4915 = vpop.f32.mrb[0].mxu0
  %4916 = vmatprep.mubr.f32.mxu0 0.0
  %4917 = vmatmul.mubr.f32.gmra.mrb[0].mxu0 %v4574
  %v4918 = vpop.f32.mrb[0].mxu0
  %v4919 = vadd.f32 0.0, %v4918
  %v4920 = vpop.f32.mrb[0].mxu0
  %4921 = vmatprep.mubr.f32.mxu0 0.0
  %4922 = vmatmul.mubr.f32.gmra.mrb[0].mxu0 %v4577
  %v4923 = vpop.f32.mrb[0].mxu0
  %v4924 = vadd.f32 0.0, %v4923
  %v4925 = vpop.f32.mrb[0].mxu0
  %4926 = vmatprep.mubr.f32.mxu0 0.0
  %4927 = vmatmul.mubr.f32.gmra.mrb[0].mxu0 %v4580
  %v4928 = vpop.f32.mrb[0].mxu0
  %v4929 = vadd.f32 0.0, %v4928
  %v4930 = vpop.f32.mrb[0].mxu0
  %4931 = vmatprep.mubr.f32.mxu0 0.0
  %4932 = vmatmul.mubr.f32.gmra.mrb[0].mxu0 %v4583
  %v4933 = vpop.f32.mrb[0].mxu0
  %v4934 = vadd.f32 0.0, %v4933
  %v4935 = vpop.f32.mrb[0].mxu0
  %4936 = vmatprep.mubr.f32.mxu0 0.0
  %4937 = vmatmul.mubr.f32.gmra.mrb[0].mxu0 %v4586
  %v4938 = vpop.f32.mrb[0].mxu0
  %v4939 = vadd.f32 0.0, %v4938
  %v4940 = vpop.f32.mrb[0].mxu0
  %4941 = vmatprep.mubr.f32.mxu0 0.0
  %4942 = vmatmul.mubr.f32.gmra.mrb[0].mxu0 %v4589
  %v4943 = vpop.f32.mrb[0].mxu0
  %v4944 = vadd.f32 0.0, %v4943
  %v4945 = vpop.f32.mrb[0].mxu0
  %4946 = vmatprep.mubr.f32.mxu0 0.0
  %4947 = vmatmul.mubr.f32.gmra.mrb[0].mxu0 %v4592
  %v4948 = vpop.f32.mrb[0].mxu0
  %v4949 = vadd.f32 0.0, %v4948
  %v4950 = vpop.f32.mrb[0].mxu0
  %4951 = vmatprep.mubr.f32.mxu0 0.0
  %4952 = vmatmul.mubr.f32.gmra.mrb[0].mxu0 %v4595
  %v4953 = vpop.f32.mrb[0].mxu0
  %v4954 = vadd.f32 0.0, %v4953
  %v4955 = vpop.f32.mrb[0].mxu0
  %4956 = vmatprep.mubr.f32.mxu0 0.0
  %4957 = vmatmul.mubr.f32.gmra.mrb[0].mxu0 %v4598
  %v4958 = vpop.f32.mrb[0].mxu0
  %v4959 = vadd.f32 0.0, %v4958
  %v4960 = vpop.f32.mrb[0].mxu0
  %4961 = vmatprep.mubr.f32.mxu0 0.0
  %4962 = vmatmul.mubr.f32.gmra.mrb[0].mxu0 %v4601
  %v4963 = vpop.f32.mrb[0].mxu0
  %v4964 = vadd.f32 0.0, %v4963
  %v4965 = vpop.f32.mrb[0].mxu0
  %4966 = vmatprep.mubr.f32.mxu0 0.0
  %4967 = vmatmul.mubr.f32.gmra.mrb[0].mxu0 %v4604
  %v4968 = vpop.f32.mrb[0].mxu0
  %v4969 = vadd.f32 0.0, %v4968
  %v4970 = vpop.f32.mrb[0].mxu0
  %4971 = vmatprep.mubr.f32.mxu0 0.0
  %4972 = vmatmul.mubr.f32.gmra.mrb[0].mxu0 %v4607
  %v4973 = vpop.f32.mrb[0].mxu0
  %v4974 = vadd.f32 0.0, %v4973
  %v4975 = vpop.f32.mrb[0].mxu0
  %4976 = vmatprep.mubr.f32.mxu0 0.0
  %4977 = vmatmul.mubr.f32.gmra.mrb[0].mxu0 %v4610
  %v4978 = vpop.f32.mrb[0].mxu0
  %v4979 = vadd.f32 0.0, %v4978
  %v4980 = vpop.f32.mrb[0].mxu0
  %4981 = vmatprep.mubr.f32.mxu0 0.0
  %4982 = vmatmul.mubr.f32.gmra.mrb[0].mxu0 %v4613
  %v4983 = vpop.f32.mrb[0].mxu0
  %v4984 = vadd.f32 0.0, %v4983
  %v4985 = vpop.f32.mrb[0].mxu0
  %4986 = vmatprep.mubr.f32.mxu0 0.0
  %4987 = vmatmul.mubr.f32.gmra.mrb[0].mxu0 %v4616
  %v4988 = vpop.f32.mrb[0].mxu0
  %v4989 = vadd.f32 0.0, %v4988
  %v4990 = vpop.f32.mrb[0].mxu0
  %4991 = vmatprep.mubr.f32.mxu0 0.0
  %4992 = vmatmul.mubr.f32.gmra.mrb[0].mxu0 %v4619
  %v4993 = vpop.f32.mrb[0].mxu0
  %v4994 = vadd.f32 0.0, %v4993
  %v4995 = vpop.f32.mrb[0].mxu0
  %4996 = vmatprep.mubr.f32.mxu0 0.0
  %4997 = vmatmul.mubr.f32.gmra.mrb[0].mxu0 %v4622
  %v4998 = vpop.f32.mrb[0].mxu0
  %v4999 = vadd.f32 0.0, %v4998
  %v5000 = vpop.f32.mrb[0].mxu0
  %5001 = vmatprep.mubr.f32.mxu0 0.0
  %5002 = vmatmul.mubr.f32.gmra.mrb[0].mxu0 %v4625
  %v5003 = vpop.f32.mrb[0].mxu0
  %v5004 = vadd.f32 0.0, %v5003
  %v5005 = vpop.f32.mrb[0].mxu0
  %5006 = vmatprep.mubr.f32.mxu0 0.0
  %5007 = vmatmul.mubr.f32.gmra.mrb[0].mxu0 %v4628
  %v5008 = vpop.f32.mrb[0].mxu0
  %v5009 = vadd.f32 0.0, %v5008
  %v5010 = vpop.f32.mrb[0].mxu0
  %5011 = vmatprep.mubr.f32.mxu0 0.0
  %5012 = vmatmul.mubr.f32.gmra.mrb[0].mxu0 %v4631
  %v5013 = vpop.f32.mrb[0].mxu0
  %v5014 = vadd.f32 0.0, %v5013
  %v5015 = vpop.f32.mrb[0].mxu0
  %5016 = vmatprep.mubr.f32.mxu0 0.0
  %5017 = vmatmul.mubr.f32.gmra.mrb[0].mxu0 %v4634
  %v5018 = vpop.f32.mrb[0].mxu0
  %v5019 = vadd.f32 0.0, %v5018
  %v5020 = vpop.f32.mrb[0].mxu0
  %5021 = vmatprep.mubr.f32.mxu0 0.0
  %5022 = vmatmul.mubr.f32.gmra.mrb[0].mxu0 %v4637
  %v5023 = vpop.f32.mrb[0].mxu0
  %v5024 = vadd.f32 0.0, %v5023
  %v5025 = vpop.f32.mrb[0].mxu0
  %5026 = vdwg.mxu0
  %v5027 = vadd.f32 %v4318, %v4709
  %v5028 = vadd.f32 %v4319, %v4714
  %v5029 = vadd.f32 %v4320, %v4719
  %v5030 = vadd.f32 %v4321, %v4724
  %v5031 = vadd.f32 %v4322, %v4729
  %v5032 = vadd.f32 %v4323, %v4734
  %v5033 = vadd.f32 %v4324, %v4739
  %v5034 = vadd.f32 %v4325, %v4744
  %v5035 = vadd.f32 %v4326, %v4749
  %v5036 = vadd.f32 %v4327, %v4754
  %v5037 = vadd.f32 %v4328, %v4759
  %v5038 = vadd.f32 %v4329, %v4764
  %v5039 = vadd.f32 %v4330, %v4769
  %v5040 = vadd.f32 %v4331, %v4774
  %v5041 = vadd.f32 %v4332, %v4779
  %v5042 = vadd.f32 %v4333, %v4784
  %v5043 = vadd.f32 %v4334, %v4789
  %v5044 = vadd.f32 %v4335, %v4794
  %v5045 = vadd.f32 %v4336, %v4799
  %v5046 = vadd.f32 %v4337, %v4804
  %v5047 = vadd.f32 %v4338, %v4809
  %v5048 = vadd.f32 %v4339, %v4814
  %v5049 = vadd.f32 %v4340, %v4819
  %v5050 = vadd.f32 %v4341, %v4824
  %v5051 = vadd.f32 %v4342, %v4829
  %v5052 = vadd.f32 %v4343, %v4834
  %v5053 = vadd.f32 %v4344, %v4839
  %v5054 = vadd.f32 %v4345, %v4844
  %v5055 = vadd.f32 %v4346, %v4849
  %v5056 = vadd.f32 %v4347, %v4854
  %v5057 = vadd.f32 %v4348, %v4859
  %v5058 = vadd.f32 %v4349, %v4864
  %v5059 = vadd.f32 %v4350, %v4869
  %v5060 = vadd.f32 %v4351, %v4874
  %v5061 = vadd.f32 %v4352, %v4879
  %v5062 = vadd.f32 %v4353, %v4884
  %v5063 = vadd.f32 %v4354, %v4889
  %v5064 = vadd.f32 %v4355, %v4894
  %v5065 = vadd.f32 %v4356, %v4899
  %v5066 = vadd.f32 %v4357, %v4904
  %v5067 = vadd.f32 %v4358, %v4909
  %v5068 = vadd.f32 %v4359, %v4914
  %v5069 = vadd.f32 %v4360, %v4919
  %v5070 = vadd.f32 %v4361, %v4924
  %v5071 = vadd.f32 %v4362, %v4929
  %v5072 = vadd.f32 %v4363, %v4934
  %v5073 = vadd.f32 %v4364, %v4939
  %v5074 = vadd.f32 %v4365, %v4944
  %v5075 = vadd.f32 %v4366, %v4949
  %v5076 = vadd.f32 %v4367, %v4954
  %v5077 = vadd.f32 %v4368, %v4959
  %v5078 = vadd.f32 %v4369, %v4964
  %v5079 = vadd.f32 %v4370, %v4969
  %v5080 = vadd.f32 %v4371, %v4974
  %v5081 = vadd.f32 %v4372, %v4979
  %v5082 = vadd.f32 %v4373, %v4984
  %v5083 = vadd.f32 %v4374, %v4989
  %v5084 = vadd.f32 %v4375, %v4994
  %v5085 = vadd.f32 %v4376, %v4999
  %v5086 = vadd.f32 %v4377, %v5004
  %v5087 = vadd.f32 %v4378, %v5009
  %v5088 = vadd.f32 %v4379, %v5014
  %v5089 = vadd.f32 %v4380, %v5019
  %v5090 = vadd.f32 %v4381, %v5024
  %v5091 = vld [vmem:[%s4382 + $0x1] sm:$0xff]
  %v5092 = vld [vmem:[%s4382 + $0x9] sm:$0xff]
  %v5093 = vld [vmem:[%s4382 + $0x19] sm:$0xff]
  %v5094 = vld [vmem:[%s4382 + $0x21] sm:$0xff]
  %v5095 = vld [vmem:[%s4382 + $0x31] sm:$0xff]
  %v5096 = vld [vmem:[%s4382 + $0x39] sm:$0xff]
  %v5097 = vld [vmem:[%s4382 + $0x49] sm:$0xff]
  %v5098 = vld [vmem:[%s4382 + $0x51] sm:$0xff]
  %v5099 = vld [vmem:[%s4382 + $0x61] sm:$0xff]
  %v5100 = vld [vmem:[%s4382 + $0x69] sm:$0xff]
  %v5101 = vld [vmem:[%s4382 + $0x79] sm:$0xff]
  %v5102 = vld [vmem:[%s4382 + $0x81] sm:$0xff]
  %v5103 = vld [vmem:[%s4382 + $0x91] sm:$0xff]
  %v5104 = vld [vmem:[%s4382 + $0x99] sm:$0xff]
  %v5105 = vld [vmem:[%s4382 + $0xa9] sm:$0xff]
  %v5106 = vld [vmem:[%s4382 + $0xb1] sm:$0xff]
  %v5107 = vld [vmem:[%s4382 + $0xc1] sm:$0xff]
  %v5108 = vld [vmem:[%s4382 + $0xc9] sm:$0xff]
  %v5109 = vld [vmem:[%s4382 + $0xd9] sm:$0xff]
  %v5110 = vld [vmem:[%s4382 + $0xe1] sm:$0xff]
  %v5111 = vld [vmem:[%s4382 + $0xf1] sm:$0xff]
  %v5112 = vld [vmem:[%s4382 + $0xf9] sm:$0xff]
  %v5113 = vld [vmem:[%s4382 + $0x109] sm:$0xff]
  %v5114 = vld [vmem:[%s4382 + $0x111] sm:$0xff]
  %v5115 = vld [vmem:[%s4382 + $0x121] sm:$0xff]
  %v5116 = vld [vmem:[%s4382 + $0x129] sm:$0xff]
  %v5117 = vld [vmem:[%s4382 + $0x139] sm:$0xff]
  %v5118 = vld [vmem:[%s4382 + $0x141] sm:$0xff]
  %v5119 = vld [vmem:[%s4382 + $0x151] sm:$0xff]
  %v5120 = vld [vmem:[%s4382 + $0x159] sm:$0xff]
  %v5121 = vld [vmem:[%s4382 + $0x169] sm:$0xff]
  %v5122 = vld [vmem:[%s4382 + $0x171] sm:$0xff]
  %v5123 = vld [vmem:[%s4382 + $0x1b1] sm:$0xff]
  %v5124 = vld [vmem:[%s4382 + $0x1b9] sm:$0xff]
  %v5125 = vld [vmem:[%s4382 + $0x1c9] sm:$0xff]
  %v5126 = vld [vmem:[%s4382 + $0x1d1] sm:$0xff]
  %v5127 = vld [vmem:[%s4382 + $0x1e1] sm:$0xff]
  %v5128 = vld [vmem:[%s4382 + $0x1e9] sm:$0xff]
  %v5129 = vld [vmem:[%s4382 + $0x1f9] sm:$0xff]
  %v5130 = vld [vmem:[%s4382 + $0x201] sm:$0xff]
  %v5131 = vld [vmem:[%s4382 + $0x211] sm:$0xff]
  %v5132 = vld [vmem:[%s4382 + $0x219] sm:$0xff]
  %v5133 = vld [vmem:[%s4382 + $0x229] sm:$0xff]
  %v5134 = vld [vmem:[%s4382 + $0x231] sm:$0xff]
  %v5135 = vld [vmem:[%s4382 + $0x241] sm:$0xff]
  %v5136 = vld [vmem:[%s4382 + $0x249] sm:$0xff]
  %v5137 = vld [vmem:[%s4382 + $0x259] sm:$0xff]
  %v5138 = vld [vmem:[%s4382 + $0x261] sm:$0xff]
  %v5139 = vld [vmem:[%s4382 + $0x271] sm:$0xff]
  %v5140 = vld [vmem:[%s4382 + $0x279] sm:$0xff]
  %v5141 = vld [vmem:[%s4382 + $0x289] sm:$0xff]
  %v5142 = vld [vmem:[%s4382 + $0x291] sm:$0xff]
  %v5143 = vld [vmem:[%s4382 + $0x2a1] sm:$0xff]
  %v5144 = vld [vmem:[%s4382 + $0x2a9] sm:$0xff]
  %v5145 = vld [vmem:[%s4382 + $0x2b9] sm:$0xff]
  %v5146 = vld [vmem:[%s4382 + $0x2c1] sm:$0xff]
  %v5147 = vld [vmem:[%s4382 + $0x2d1] sm:$0xff]
  %v5148 = vld [vmem:[%s4382 + $0x2d9] sm:$0xff]
  %v5149 = vld [vmem:[%s4382 + $0x2e9] sm:$0xff]
  %v5150 = vld [vmem:[%s4382 + $0x2f1] sm:$0xff]
  %v5151 = vld [vmem:[%s4382 + $0x301] sm:$0xff]
  %v5152 = vld [vmem:[%s4382 + $0x309] sm:$0xff]
  %v5153 = vld [vmem:[%s4382 + $0x319] sm:$0xff]
  %v5154 = vld [vmem:[%s4382 + $0x321] sm:$0xff]
  %v5156 = vsel %vm44, %v5091, 0
  %v5159 = vsel %vm44, %v5092, 0
  %v5162 = vsel %vm44, %v5093, 0
  %v5165 = vsel %vm44, %v5094, 0
  %v5168 = vsel %vm44, %v5095, 0
  %v5171 = vsel %vm44, %v5096, 0
  %v5174 = vsel %vm44, %v5097, 0
  %v5177 = vsel %vm44, %v5098, 0
  %v5180 = vsel %vm44, %v5099, 0
  %v5183 = vsel %vm44, %v5100, 0
  %v5186 = vsel %vm44, %v5101, 0
  %v5189 = vsel %vm44, %v5102, 0
  %v5192 = vsel %vm44, %v5103, 0
  %v5195 = vsel %vm44, %v5104, 0
  %v5198 = vsel %vm44, %v5105, 0
  %v5201 = vsel %vm44, %v5106, 0
  %v5204 = vsel %vm44, %v5107, 0
  %v5207 = vsel %vm44, %v5108, 0
  %v5210 = vsel %vm44, %v5109, 0
  %v5213 = vsel %vm44, %v5110, 0
  %v5216 = vsel %vm44, %v5111, 0
  %v5219 = vsel %vm44, %v5112, 0
  %v5222 = vsel %vm44, %v5113, 0
  %v5225 = vsel %vm44, %v5114, 0
  %v5228 = vsel %vm44, %v5115, 0
  %v5231 = vsel %vm44, %v5116, 0
  %v5234 = vsel %vm44, %v5117, 0
  %v5237 = vsel %vm44, %v5118, 0
  %v5240 = vsel %vm44, %v5119, 0
  %v5243 = vsel %vm44, %v5120, 0
  %v5246 = vsel %vm44, %v5121, 0
  %v5249 = vsel %vm44, %v5122, 0
  %v5252 = vsel %vm44, %v5123, 0
  %v5255 = vsel %vm44, %v5124, 0
  %v5258 = vsel %vm44, %v5125, 0
  %v5261 = vsel %vm44, %v5126, 0
  %v5264 = vsel %vm44, %v5127, 0
  %v5267 = vsel %vm44, %v5128, 0
  %v5270 = vsel %vm44, %v5129, 0
  %v5273 = vsel %vm44, %v5130, 0
  %v5276 = vsel %vm44, %v5131, 0
  %v5279 = vsel %vm44, %v5132, 0
  %v5282 = vsel %vm44, %v5133, 0
  %v5285 = vsel %vm44, %v5134, 0
  %v5288 = vsel %vm44, %v5135, 0
  %v5291 = vsel %vm44, %v5136, 0
  %v5294 = vsel %vm44, %v5137, 0
  %v5297 = vsel %vm44, %v5138, 0
  %v5300 = vsel %vm44, %v5139, 0
  %v5303 = vsel %vm44, %v5140, 0
  %v5306 = vsel %vm44, %v5141, 0
  %v5309 = vsel %vm44, %v5142, 0
  %v5312 = vsel %vm44, %v5143, 0
  %v5315 = vsel %vm44, %v5144, 0
  %v5318 = vsel %vm44, %v5145, 0
  %v5321 = vsel %vm44, %v5146, 0
  %v5324 = vsel %vm44, %v5147, 0
  %v5327 = vsel %vm44, %v5148, 0
  %v5330 = vsel %vm44, %v5149, 0
  %v5333 = vsel %vm44, %v5150, 0
  %v5336 = vsel %vm44, %v5151, 0
  %v5339 = vsel %vm44, %v5152, 0
  %v5342 = vsel %vm44, %v5153, 0
  %v5345 = vsel %vm44, %v5154, 0
  %v5348 = vsel %vm581, %v33, 0
  %5350 = vmatprep.subr.mxu0 0.0
  %5351 = vmatpush1.msra.mxu0 %v5348
  %5352 = vmatprep.subr.mxu0 0.0
  %5353 = vmatpush1.msra.mxu0 0.0
  %5354 = vmatprep.subr.mxu0 0.0
  %5355 = vmatpush1.msra.mxu0 0.0
  %5356 = vmatprep.subr.mxu0 0.0
  %5357 = vmatpush1.msra.mxu0 0.0
  %5358 = vmatprep.subr.mxu0 0.0
  %5359 = vmatpush1.msra.mxu0 0.0
  %5360 = vmatprep.subr.mxu0 0.0
  %5361 = vmatpush1.msra.mxu0 0.0
  %5362 = vmatprep.subr.mxu0 0.0
  %5363 = vmatpush1.msra.mxu0 0.0
  %5364 = vmatprep.subr.mxu0 0.0
  %5365 = vmatpush1.msra.mxu0 0.0
  %5366 = vmatprep.subr.mxu0 0.0
  %5367 = vmatpush1.msra.mxu0 0.0
  %5368 = vmatprep.subr.mxu0 0.0
  %5369 = vmatpush1.msra.mxu0 0.0
  %5370 = vmatprep.subr.mxu0 0.0
  %5371 = vmatpush1.msra.mxu0 0.0
  %5372 = vmatprep.subr.mxu0 0.0
  %5373 = vmatpush1.msra.mxu0 0.0
  %5374 = vmatprep.subr.mxu0 0.0
  %5375 = vmatpush1.msra.mxu0 0.0
  %5376 = vmatprep.subr.mxu0 0.0
  %5377 = vmatpush1.msra.mxu0 0.0
  %5378 = vmatprep.subr.mxu0 0.0
  %5379 = vmatpush1.msra.mxu0 0.0
  %5380 = vmatprep.subr.mxu0 0.0
  %5381 = vmatpush1.msra.mxu0 0.0
  %5382 = vmatprep.subr.mxu0 0.0
  %5383 = vmatpush1.msra.mxu0 0.0
  %5384 = vmatprep.subr.mxu0 0.0
  %5385 = vmatpush1.msra.mxu0 0.0
  %5386 = vmatprep.subr.mxu0 0.0
  %5387 = vmatpush1.msra.mxu0 0.0
  %5388 = vmatprep.subr.mxu0 0.0
  %5389 = vmatpush1.msra.mxu0 0.0
  %5390 = vmatprep.subr.mxu0 0.0
  %5391 = vmatpush1.msra.mxu0 0.0
  %5392 = vmatprep.subr.mxu0 0.0
  %5393 = vmatpush1.msra.mxu0 0.0
  %5394 = vmatprep.subr.mxu0 0.0
  %5395 = vmatpush1.msra.mxu0 0.0
  %5396 = vmatprep.subr.mxu0 0.0
  %5397 = vmatpush1.msra.mxu0 0.0
  %5398 = vmatprep.subr.mxu0 0.0
  %5399 = vmatpush1.msra.mxu0 0.0
  %5400 = vmatprep.subr.mxu0 0.0
  %5401 = vmatpush1.msra.mxu0 0.0
  %5402 = vmatprep.subr.mxu0 0.0
  %5403 = vmatpush1.msra.mxu0 0.0
  %5404 = vmatprep.subr.mxu0 0.0
  %5405 = vmatpush1.msra.mxu0 0.0
  %5406 = vmatprep.subr.mxu0 0.0
  %5407 = vmatpush1.msra.mxu0 0.0
  %5408 = vmatprep.subr.mxu0 0.0
  %5409 = vmatpush1.msra.mxu0 0.0
  %5410 = vmatprep.subr.mxu0 0.0
  %5411 = vmatpush1.msra.mxu0 0.0
  %5412 = vmatprep.subr.mxu0 0.0
  %5413 = vmatpush1.msra.mxu0 0.0
  %5414 = vmatprep.mubr.f32.mxu0 0.0
  %5415 = vmatmul.mubr.f32.gmra.mrb[0].mxu0 %v5156
  %v5416 = vpop.f32.mrb[0].mxu0
  %v5417 = vadd.f32 0.0, %v5416
  %v5418 = vpop.f32.mrb[0].mxu0
  %5419 = vmatprep.mubr.f32.mxu0 0.0
  %5420 = vmatmul.mubr.f32.gmra.mrb[0].mxu0 %v5159
  %v5421 = vpop.f32.mrb[0].mxu0
  %v5422 = vadd.f32 0.0, %v5421
  %v5423 = vpop.f32.mrb[0].mxu0
  %5424 = vmatprep.mubr.f32.mxu0 0.0
  %5425 = vmatmul.mubr.f32.gmra.mrb[0].mxu0 %v5162
  %v5426 = vpop.f32.mrb[0].mxu0
  %v5427 = vadd.f32 0.0, %v5426
  %v5428 = vpop.f32.mrb[0].mxu0
  %5429 = vmatprep.mubr.f32.mxu0 0.0
  %5430 = vmatmul.mubr.f32.gmra.mrb[0].mxu0 %v5165
  %v5431 = vpop.f32.mrb[0].mxu0
  %v5432 = vadd.f32 0.0, %v5431
  %v5433 = vpop.f32.mrb[0].mxu0
  %5434 = vmatprep.mubr.f32.mxu0 0.0
  %5435 = vmatmul.mubr.f32.gmra.mrb[0].mxu0 %v5168
  %v5436 = vpop.f32.mrb[0].mxu0
  %v5437 = vadd.f32 0.0, %v5436
  %v5438 = vpop.f32.mrb[0].mxu0
  %5439 = vmatprep.mubr.f32.mxu0 0.0
  %5440 = vmatmul.mubr.f32.gmra.mrb[0].mxu0 %v5171
  %v5441 = vpop.f32.mrb[0].mxu0
  %v5442 = vadd.f32 0.0, %v5441
  %v5443 = vpop.f32.mrb[0].mxu0
  %5444 = vmatprep.mubr.f32.mxu0 0.0
  %5445 = vmatmul.mubr.f32.gmra.mrb[0].mxu0 %v5174
  %v5446 = vpop.f32.mrb[0].mxu0
  %v5447 = vadd.f32 0.0, %v5446
  %v5448 = vpop.f32.mrb[0].mxu0
  %5449 = vmatprep.mubr.f32.mxu0 0.0
  %5450 = vmatmul.mubr.f32.gmra.mrb[0].mxu0 %v5177
  %v5451 = vpop.f32.mrb[0].mxu0
  %v5452 = vadd.f32 0.0, %v5451
  %v5453 = vpop.f32.mrb[0].mxu0
  %5454 = vmatprep.mubr.f32.mxu0 0.0
  %5455 = vmatmul.mubr.f32.gmra.mrb[0].mxu0 %v5180
  %v5456 = vpop.f32.mrb[0].mxu0
  %v5457 = vadd.f32 0.0, %v5456
  %v5458 = vpop.f32.mrb[0].mxu0
  %5459 = vmatprep.mubr.f32.mxu0 0.0
  %5460 = vmatmul.mubr.f32.gmra.mrb[0].mxu0 %v5183
  %v5461 = vpop.f32.mrb[0].mxu0
  %v5462 = vadd.f32 0.0, %v5461
  %v5463 = vpop.f32.mrb[0].mxu0
  %5464 = vmatprep.mubr.f32.mxu0 0.0
  %5465 = vmatmul.mubr.f32.gmra.mrb[0].mxu0 %v5186
  %v5466 = vpop.f32.mrb[0].mxu0
  %v5467 = vadd.f32 0.0, %v5466
  %v5468 = vpop.f32.mrb[0].mxu0
  %5469 = vmatprep.mubr.f32.mxu0 0.0
  %5470 = vmatmul.mubr.f32.gmra.mrb[0].mxu0 %v5189
  %v5471 = vpop.f32.mrb[0].mxu0
  %v5472 = vadd.f32 0.0, %v5471
  %v5473 = vpop.f32.mrb[0].mxu0
  %5474 = vmatprep.mubr.f32.mxu0 0.0
  %5475 = vmatmul.mubr.f32.gmra.mrb[0].mxu0 %v5192
  %v5476 = vpop.f32.mrb[0].mxu0
  %v5477 = vadd.f32 0.0, %v5476
  %v5478 = vpop.f32.mrb[0].mxu0
  %5479 = vmatprep.mubr.f32.mxu0 0.0
  %5480 = vmatmul.mubr.f32.gmra.mrb[0].mxu0 %v5195
  %v5481 = vpop.f32.mrb[0].mxu0
  %v5482 = vadd.f32 0.0, %v5481
  %v5483 = vpop.f32.mrb[0].mxu0
  %5484 = vmatprep.mubr.f32.mxu0 0.0
  %5485 = vmatmul.mubr.f32.gmra.mrb[0].mxu0 %v5198
  %v5486 = vpop.f32.mrb[0].mxu0
  %v5487 = vadd.f32 0.0, %v5486
  %v5488 = vpop.f32.mrb[0].mxu0
  %5489 = vmatprep.mubr.f32.mxu0 0.0
  %5490 = vmatmul.mubr.f32.gmra.mrb[0].mxu0 %v5201
  %v5491 = vpop.f32.mrb[0].mxu0
  %v5492 = vadd.f32 0.0, %v5491
  %v5493 = vpop.f32.mrb[0].mxu0
  %5494 = vmatprep.mubr.f32.mxu0 0.0
  %5495 = vmatmul.mubr.f32.gmra.mrb[0].mxu0 %v5204
  %v5496 = vpop.f32.mrb[0].mxu0
  %v5497 = vadd.f32 0.0, %v5496
  %v5498 = vpop.f32.mrb[0].mxu0
  %5499 = vmatprep.mubr.f32.mxu0 0.0
  %5500 = vmatmul.mubr.f32.gmra.mrb[0].mxu0 %v5207
  %v5501 = vpop.f32.mrb[0].mxu0
  %v5502 = vadd.f32 0.0, %v5501
  %v5503 = vpop.f32.mrb[0].mxu0
  %5504 = vmatprep.mubr.f32.mxu0 0.0
  %5505 = vmatmul.mubr.f32.gmra.mrb[0].mxu0 %v5210
  %v5506 = vpop.f32.mrb[0].mxu0
  %v5507 = vadd.f32 0.0, %v5506
  %v5508 = vpop.f32.mrb[0].mxu0
  %5509 = vmatprep.mubr.f32.mxu0 0.0
  %5510 = vmatmul.mubr.f32.gmra.mrb[0].mxu0 %v5213
  %v5511 = vpop.f32.mrb[0].mxu0
  %v5512 = vadd.f32 0.0, %v5511
  %v5513 = vpop.f32.mrb[0].mxu0
  %5514 = vmatprep.mubr.f32.mxu0 0.0
  %5515 = vmatmul.mubr.f32.gmra.mrb[0].mxu0 %v5216
  %v5516 = vpop.f32.mrb[0].mxu0
  %v5517 = vadd.f32 0.0, %v5516
  %v5518 = vpop.f32.mrb[0].mxu0
  %5519 = vmatprep.mubr.f32.mxu0 0.0
  %5520 = vmatmul.mubr.f32.gmra.mrb[0].mxu0 %v5219
  %v5521 = vpop.f32.mrb[0].mxu0
  %v5522 = vadd.f32 0.0, %v5521
  %v5523 = vpop.f32.mrb[0].mxu0
  %5524 = vmatprep.mubr.f32.mxu0 0.0
  %5525 = vmatmul.mubr.f32.gmra.mrb[0].mxu0 %v5222
  %v5526 = vpop.f32.mrb[0].mxu0
  %v5527 = vadd.f32 0.0, %v5526
  %v5528 = vpop.f32.mrb[0].mxu0
  %5529 = vmatprep.mubr.f32.mxu0 0.0
  %5530 = vmatmul.mubr.f32.gmra.mrb[0].mxu0 %v5225
  %v5531 = vpop.f32.mrb[0].mxu0
  %v5532 = vadd.f32 0.0, %v5531
  %v5533 = vpop.f32.mrb[0].mxu0
  %5534 = vmatprep.mubr.f32.mxu0 0.0
  %5535 = vmatmul.mubr.f32.gmra.mrb[0].mxu0 %v5228
  %v5536 = vpop.f32.mrb[0].mxu0
  %v5537 = vadd.f32 0.0, %v5536
  %v5538 = vpop.f32.mrb[0].mxu0
  %5539 = vmatprep.mubr.f32.mxu0 0.0
  %5540 = vmatmul.mubr.f32.gmra.mrb[0].mxu0 %v5231
  %v5541 = vpop.f32.mrb[0].mxu0
  %v5542 = vadd.f32 0.0, %v5541
  %v5543 = vpop.f32.mrb[0].mxu0
  %5544 = vmatprep.mubr.f32.mxu0 0.0
  %5545 = vmatmul.mubr.f32.gmra.mrb[0].mxu0 %v5234
  %v5546 = vpop.f32.mrb[0].mxu0
  %v5547 = vadd.f32 0.0, %v5546
  %v5548 = vpop.f32.mrb[0].mxu0
  %5549 = vmatprep.mubr.f32.mxu0 0.0
  %5550 = vmatmul.mubr.f32.gmra.mrb[0].mxu0 %v5237
  %v5551 = vpop.f32.mrb[0].mxu0
  %v5552 = vadd.f32 0.0, %v5551
  %v5553 = vpop.f32.mrb[0].mxu0
  %5554 = vmatprep.mubr.f32.mxu0 0.0
  %5555 = vmatmul.mubr.f32.gmra.mrb[0].mxu0 %v5240
  %v5556 = vpop.f32.mrb[0].mxu0
  %v5557 = vadd.f32 0.0, %v5556
  %v5558 = vpop.f32.mrb[0].mxu0
  %5559 = vmatprep.mubr.f32.mxu0 0.0
  %5560 = vmatmul.mubr.f32.gmra.mrb[0].mxu0 %v5243
  %v5561 = vpop.f32.mrb[0].mxu0
  %v5562 = vadd.f32 0.0, %v5561
  %v5563 = vpop.f32.mrb[0].mxu0
  %5564 = vmatprep.mubr.f32.mxu0 0.0
  %5565 = vmatmul.mubr.f32.gmra.mrb[0].mxu0 %v5246
  %v5566 = vpop.f32.mrb[0].mxu0
  %v5567 = vadd.f32 0.0, %v5566
  %v5568 = vpop.f32.mrb[0].mxu0
  %5569 = vmatprep.mubr.f32.mxu0 0.0
  %5570 = vmatmul.mubr.f32.gmra.mrb[0].mxu0 %v5249
  %v5571 = vpop.f32.mrb[0].mxu0
  %v5572 = vadd.f32 0.0, %v5571
  %v5573 = vpop.f32.mrb[0].mxu0
  %5574 = vmatprep.mubr.f32.mxu0 0.0
  %5575 = vmatmul.mubr.f32.gmra.mrb[0].mxu0 %v5252
  %v5576 = vpop.f32.mrb[0].mxu0
  %v5577 = vadd.f32 0.0, %v5576
  %v5578 = vpop.f32.mrb[0].mxu0
  %5579 = vmatprep.mubr.f32.mxu0 0.0
  %5580 = vmatmul.mubr.f32.gmra.mrb[0].mxu0 %v5255
  %v5581 = vpop.f32.mrb[0].mxu0
  %v5582 = vadd.f32 0.0, %v5581
  %v5583 = vpop.f32.mrb[0].mxu0
  %5584 = vmatprep.mubr.f32.mxu0 0.0
  %5585 = vmatmul.mubr.f32.gmra.mrb[0].mxu0 %v5258
  %v5586 = vpop.f32.mrb[0].mxu0
  %v5587 = vadd.f32 0.0, %v5586
  %v5588 = vpop.f32.mrb[0].mxu0
  %5589 = vmatprep.mubr.f32.mxu0 0.0
  %5590 = vmatmul.mubr.f32.gmra.mrb[0].mxu0 %v5261
  %v5591 = vpop.f32.mrb[0].mxu0
  %v5592 = vadd.f32 0.0, %v5591
  %v5593 = vpop.f32.mrb[0].mxu0
  %5594 = vmatprep.mubr.f32.mxu0 0.0
  %5595 = vmatmul.mubr.f32.gmra.mrb[0].mxu0 %v5264
  %v5596 = vpop.f32.mrb[0].mxu0
  %v5597 = vadd.f32 0.0, %v5596
  %v5598 = vpop.f32.mrb[0].mxu0
  %5599 = vmatprep.mubr.f32.mxu0 0.0
  %5600 = vmatmul.mubr.f32.gmra.mrb[0].mxu0 %v5267
  %v5601 = vpop.f32.mrb[0].mxu0
  %v5602 = vadd.f32 0.0, %v5601
  %v5603 = vpop.f32.mrb[0].mxu0
  %5604 = vmatprep.mubr.f32.mxu0 0.0
  %5605 = vmatmul.mubr.f32.gmra.mrb[0].mxu0 %v5270
  %v5606 = vpop.f32.mrb[0].mxu0
  %v5607 = vadd.f32 0.0, %v5606
  %v5608 = vpop.f32.mrb[0].mxu0
  %5609 = vmatprep.mubr.f32.mxu0 0.0
  %5610 = vmatmul.mubr.f32.gmra.mrb[0].mxu0 %v5273
  %v5611 = vpop.f32.mrb[0].mxu0
  %v5612 = vadd.f32 0.0, %v5611
  %v5613 = vpop.f32.mrb[0].mxu0
  %5614 = vmatprep.mubr.f32.mxu0 0.0
  %5615 = vmatmul.mubr.f32.gmra.mrb[0].mxu0 %v5276
  %v5616 = vpop.f32.mrb[0].mxu0
  %v5617 = vadd.f32 0.0, %v5616
  %v5618 = vpop.f32.mrb[0].mxu0
  %5619 = vmatprep.mubr.f32.mxu0 0.0
  %5620 = vmatmul.mubr.f32.gmra.mrb[0].mxu0 %v5279
  %v5621 = vpop.f32.mrb[0].mxu0
  %v5622 = vadd.f32 0.0, %v5621
  %v5623 = vpop.f32.mrb[0].mxu0
  %5624 = vmatprep.mubr.f32.mxu0 0.0
  %5625 = vmatmul.mubr.f32.gmra.mrb[0].mxu0 %v5282
  %v5626 = vpop.f32.mrb[0].mxu0
  %v5627 = vadd.f32 0.0, %v5626
  %v5628 = vpop.f32.mrb[0].mxu0
  %5629 = vmatprep.mubr.f32.mxu0 0.0
  %5630 = vmatmul.mubr.f32.gmra.mrb[0].mxu0 %v5285
  %v5631 = vpop.f32.mrb[0].mxu0
  %v5632 = vadd.f32 0.0, %v5631
  %v5633 = vpop.f32.mrb[0].mxu0
  %5634 = vmatprep.mubr.f32.mxu0 0.0
  %5635 = vmatmul.mubr.f32.gmra.mrb[0].mxu0 %v5288
  %v5636 = vpop.f32.mrb[0].mxu0
  %v5637 = vadd.f32 0.0, %v5636
  %v5638 = vpop.f32.mrb[0].mxu0
  %5639 = vmatprep.mubr.f32.mxu0 0.0
  %5640 = vmatmul.mubr.f32.gmra.mrb[0].mxu0 %v5291
  %v5641 = vpop.f32.mrb[0].mxu0
  %v5642 = vadd.f32 0.0, %v5641
  %v5643 = vpop.f32.mrb[0].mxu0
  %5644 = vmatprep.mubr.f32.mxu0 0.0
  %5645 = vmatmul.mubr.f32.gmra.mrb[0].mxu0 %v5294
  %v5646 = vpop.f32.mrb[0].mxu0
  %v5647 = vadd.f32 0.0, %v5646
  %v5648 = vpop.f32.mrb[0].mxu0
  %5649 = vmatprep.mubr.f32.mxu0 0.0
  %5650 = vmatmul.mubr.f32.gmra.mrb[0].mxu0 %v5297
  %v5651 = vpop.f32.mrb[0].mxu0
  %v5652 = vadd.f32 0.0, %v5651
  %v5653 = vpop.f32.mrb[0].mxu0
  %5654 = vmatprep.mubr.f32.mxu0 0.0
  %5655 = vmatmul.mubr.f32.gmra.mrb[0].mxu0 %v5300
  %v5656 = vpop.f32.mrb[0].mxu0
  %v5657 = vadd.f32 0.0, %v5656
  %v5658 = vpop.f32.mrb[0].mxu0
  %5659 = vmatprep.mubr.f32.mxu0 0.0
  %5660 = vmatmul.mubr.f32.gmra.mrb[0].mxu0 %v5303
  %v5661 = vpop.f32.mrb[0].mxu0
  %v5662 = vadd.f32 0.0, %v5661
  %v5663 = vpop.f32.mrb[0].mxu0
  %5664 = vmatprep.mubr.f32.mxu0 0.0
  %5665 = vmatmul.mubr.f32.gmra.mrb[0].mxu0 %v5306
  %v5666 = vpop.f32.mrb[0].mxu0
  %v5667 = vadd.f32 0.0, %v5666
  %v5668 = vpop.f32.mrb[0].mxu0
  %5669 = vmatprep.mubr.f32.mxu0 0.0
  %5670 = vmatmul.mubr.f32.gmra.mrb[0].mxu0 %v5309
  %v5671 = vpop.f32.mrb[0].mxu0
  %v5672 = vadd.f32 0.0, %v5671
  %v5673 = vpop.f32.mrb[0].mxu0
  %5674 = vmatprep.mubr.f32.mxu0 0.0
  %5675 = vmatmul.mubr.f32.gmra.mrb[0].mxu0 %v5312
  %v5676 = vpop.f32.mrb[0].mxu0
  %v5677 = vadd.f32 0.0, %v5676
  %v5678 = vpop.f32.mrb[0].mxu0
  %5679 = vmatprep.mubr.f32.mxu0 0.0
  %5680 = vmatmul.mubr.f32.gmra.mrb[0].mxu0 %v5315
  %v5681 = vpop.f32.mrb[0].mxu0
  %v5682 = vadd.f32 0.0, %v5681
  %v5683 = vpop.f32.mrb[0].mxu0
  %5684 = vmatprep.mubr.f32.mxu0 0.0
  %5685 = vmatmul.mubr.f32.gmra.mrb[0].mxu0 %v5318
  %v5686 = vpop.f32.mrb[0].mxu0
  %v5687 = vadd.f32 0.0, %v5686
  %v5688 = vpop.f32.mrb[0].mxu0
  %5689 = vmatprep.mubr.f32.mxu0 0.0
  %5690 = vmatmul.mubr.f32.gmra.mrb[0].mxu0 %v5321
  %v5691 = vpop.f32.mrb[0].mxu0
  %v5692 = vadd.f32 0.0, %v5691
  %v5693 = vpop.f32.mrb[0].mxu0
  %5694 = vmatprep.mubr.f32.mxu0 0.0
  %5695 = vmatmul.mubr.f32.gmra.mrb[0].mxu0 %v5324
  %v5696 = vpop.f32.mrb[0].mxu0
  %v5697 = vadd.f32 0.0, %v5696
  %v5698 = vpop.f32.mrb[0].mxu0
  %5699 = vmatprep.mubr.f32.mxu0 0.0
  %5700 = vmatmul.mubr.f32.gmra.mrb[0].mxu0 %v5327
  %v5701 = vpop.f32.mrb[0].mxu0
  %v5702 = vadd.f32 0.0, %v5701
  %v5703 = vpop.f32.mrb[0].mxu0
  %5704 = vmatprep.mubr.f32.mxu0 0.0
  %5705 = vmatmul.mubr.f32.gmra.mrb[0].mxu0 %v5330
  %v5706 = vpop.f32.mrb[0].mxu0
  %v5707 = vadd.f32 0.0, %v5706
  %v5708 = vpop.f32.mrb[0].mxu0
  %5709 = vmatprep.mubr.f32.mxu0 0.0
  %5710 = vmatmul.mubr.f32.gmra.mrb[0].mxu0 %v5333
  %v5711 = vpop.f32.mrb[0].mxu0
  %v5712 = vadd.f32 0.0, %v5711
  %v5713 = vpop.f32.mrb[0].mxu0
  %5714 = vmatprep.mubr.f32.mxu0 0.0
  %5715 = vmatmul.mubr.f32.gmra.mrb[0].mxu0 %v5336
  %v5716 = vpop.f32.mrb[0].mxu0
  %v5717 = vadd.f32 0.0, %v5716
  %v5718 = vpop.f32.mrb[0].mxu0
  %5719 = vmatprep.mubr.f32.mxu0 0.0
  %5720 = vmatmul.mubr.f32.gmra.mrb[0].mxu0 %v5339
  %v5721 = vpop.f32.mrb[0].mxu0
  %v5722 = vadd.f32 0.0, %v5721
  %v5723 = vpop.f32.mrb[0].mxu0
  %5724 = vmatprep.mubr.f32.mxu0 0.0
  %5725 = vmatmul.mubr.f32.gmra.mrb[0].mxu0 %v5342
  %v5726 = vpop.f32.mrb[0].mxu0
  %v5727 = vadd.f32 0.0, %v5726
  %v5728 = vpop.f32.mrb[0].mxu0
  %5729 = vmatprep.mubr.f32.mxu0 0.0
  %5730 = vmatmul.mubr.f32.gmra.mrb[0].mxu0 %v5345
  %v5731 = vpop.f32.mrb[0].mxu0
  %v5732 = vadd.f32 0.0, %v5731
  %v5733 = vpop.f32.mrb[0].mxu0
  %5734 = vdwg.mxu0
  %v5735 = vadd.f32 %v5027, %v5417
  %v5736 = vadd.f32 %v5028, %v5422
  %v5737 = vadd.f32 %v5029, %v5427
  %v5738 = vadd.f32 %v5030, %v5432
  %v5739 = vadd.f32 %v5031, %v5437
  %v5740 = vadd.f32 %v5032, %v5442
  %v5741 = vadd.f32 %v5033, %v5447
  %v5742 = vadd.f32 %v5034, %v5452
  %v5743 = vadd.f32 %v5035, %v5457
  %v5744 = vadd.f32 %v5036, %v5462
  %v5745 = vadd.f32 %v5037, %v5467
  %v5746 = vadd.f32 %v5038, %v5472
  %v5747 = vadd.f32 %v5039, %v5477
  %v5748 = vadd.f32 %v5040, %v5482
  %v5749 = vadd.f32 %v5041, %v5487
  %v5750 = vadd.f32 %v5042, %v5492
  %v5751 = vadd.f32 %v5043, %v5497
  %v5752 = vadd.f32 %v5044, %v5502
  %v5753 = vadd.f32 %v5045, %v5507
  %v5754 = vadd.f32 %v5046, %v5512
  %v5755 = vadd.f32 %v5047, %v5517
  %v5756 = vadd.f32 %v5048, %v5522
  %v5757 = vadd.f32 %v5049, %v5527
  %v5758 = vadd.f32 %v5050, %v5532
  %v5759 = vadd.f32 %v5051, %v5537
  %v5760 = vadd.f32 %v5052, %v5542
  %v5761 = vadd.f32 %v5053, %v5547
  %v5762 = vadd.f32 %v5054, %v5552
  %v5763 = vadd.f32 %v5055, %v5557
  %v5764 = vadd.f32 %v5056, %v5562
  %v5765 = vadd.f32 %v5057, %v5567
  %v5766 = vadd.f32 %v5058, %v5572
  %v5767 = vadd.f32 %v5059, %v5577
  %v5768 = vadd.f32 %v5060, %v5582
  %v5769 = vadd.f32 %v5061, %v5587
  %v5770 = vadd.f32 %v5062, %v5592
  %v5771 = vadd.f32 %v5063, %v5597
  %v5772 = vadd.f32 %v5064, %v5602
  %v5773 = vadd.f32 %v5065, %v5607
  %v5774 = vadd.f32 %v5066, %v5612
  %v5775 = vadd.f32 %v5067, %v5617
  %v5776 = vadd.f32 %v5068, %v5622
  %v5777 = vadd.f32 %v5069, %v5627
  %v5778 = vadd.f32 %v5070, %v5632
  %v5779 = vadd.f32 %v5071, %v5637
  %v5780 = vadd.f32 %v5072, %v5642
  %v5781 = vadd.f32 %v5073, %v5647
  %v5782 = vadd.f32 %v5074, %v5652
  %v5783 = vadd.f32 %v5075, %v5657
  %v5784 = vadd.f32 %v5076, %v5662
  %v5785 = vadd.f32 %v5077, %v5667
  %v5786 = vadd.f32 %v5078, %v5672
  %v5787 = vadd.f32 %v5079, %v5677
  %v5788 = vadd.f32 %v5080, %v5682
  %v5789 = vadd.f32 %v5081, %v5687
  %v5790 = vadd.f32 %v5082, %v5692
  %v5791 = vadd.f32 %v5083, %v5697
  %v5792 = vadd.f32 %v5084, %v5702
  %v5793 = vadd.f32 %v5085, %v5707
  %v5794 = vadd.f32 %v5086, %v5712
  %v5795 = vadd.f32 %v5087, %v5717
  %v5796 = vadd.f32 %v5088, %v5722
  %v5797 = vadd.f32 %v5089, %v5727
  %v5798 = vadd.f32 %v5090, %v5732
  %v5799 = vld [vmem:[%s4382 + $0x2] sm:$0xff]
  %v5800 = vld [vmem:[%s4382 + $0xa] sm:$0xff]
  %v5801 = vld [vmem:[%s4382 + $0x1a] sm:$0xff]
  %v5802 = vld [vmem:[%s4382 + $0x22] sm:$0xff]
  %v5803 = vld [vmem:[%s4382 + $0x32] sm:$0xff]
  %v5804 = vld [vmem:[%s4382 + $0x3a] sm:$0xff]
  %v5805 = vld [vmem:[%s4382 + $0x4a] sm:$0xff]
  %v5806 = vld [vmem:[%s4382 + $0x52] sm:$0xff]
  %v5807 = vld [vmem:[%s4382 + $0x62] sm:$0xff]
  %v5808 = vld [vmem:[%s4382 + $0x6a] sm:$0xff]
  %v5809 = vld [vmem:[%s4382 + $0x7a] sm:$0xff]
  %v5810 = vld [vmem:[%s4382 + $0x82] sm:$0xff]
  %v5811 = vld [vmem:[%s4382 + $0x92] sm:$0xff]
  %v5812 = vld [vmem:[%s4382 + $0x9a] sm:$0xff]
  %v5813 = vld [vmem:[%s4382 + $0xaa] sm:$0xff]
  %v5814 = vld [vmem:[%s4382 + $0xb2] sm:$0xff]
  %v5815 = vld [vmem:[%s4382 + $0xc2] sm:$0xff]
  %v5816 = vld [vmem:[%s4382 + $0xca] sm:$0xff]
  %v5817 = vld [vmem:[%s4382 + $0xda] sm:$0xff]
  %v5818 = vld [vmem:[%s4382 + $0xe2] sm:$0xff]
  %v5819 = vld [vmem:[%s4382 + $0xf2] sm:$0xff]
  %v5820 = vld [vmem:[%s4382 + $0xfa] sm:$0xff]
  %v5821 = vld [vmem:[%s4382 + $0x10a] sm:$0xff]
  %v5822 = vld [vmem:[%s4382 + $0x112] sm:$0xff]
  %v5823 = vld [vmem:[%s4382 + $0x122] sm:$0xff]
  %v5824 = vld [vmem:[%s4382 + $0x12a] sm:$0xff]
  %v5825 = vld [vmem:[%s4382 + $0x13a] sm:$0xff]
  %v5826 = vld [vmem:[%s4382 + $0x142] sm:$0xff]
  %v5827 = vld [vmem:[%s4382 + $0x152] sm:$0xff]
  %v5828 = vld [vmem:[%s4382 + $0x15a] sm:$0xff]
  %v5829 = vld [vmem:[%s4382 + $0x16a] sm:$0xff]
  %v5830 = vld [vmem:[%s4382 + $0x172] sm:$0xff]
  %v5831 = vld [vmem:[%s4382 + $0x1b2] sm:$0xff]
  %v5832 = vld [vmem:[%s4382 + $0x1ba] sm:$0xff]
  %v5833 = vld [vmem:[%s4382 + $0x1ca] sm:$0xff]
  %v5834 = vld [vmem:[%s4382 + $0x1d2] sm:$0xff]
  %v5835 = vld [vmem:[%s4382 + $0x1e2] sm:$0xff]
  %v5836 = vld [vmem:[%s4382 + $0x1ea] sm:$0xff]
  %v5837 = vld [vmem:[%s4382 + $0x1fa] sm:$0xff]
  %v5838 = vld [vmem:[%s4382 + $0x202] sm:$0xff]
  %v5839 = vld [vmem:[%s4382 + $0x212] sm:$0xff]
  %v5840 = vld [vmem:[%s4382 + $0x21a] sm:$0xff]
  %v5841 = vld [vmem:[%s4382 + $0x22a] sm:$0xff]
  %v5842 = vld [vmem:[%s4382 + $0x232] sm:$0xff]
  %v5843 = vld [vmem:[%s4382 + $0x242] sm:$0xff]
  %v5844 = vld [vmem:[%s4382 + $0x24a] sm:$0xff]
  %v5845 = vld [vmem:[%s4382 + $0x25a] sm:$0xff]
  %v5846 = vld [vmem:[%s4382 + $0x262] sm:$0xff]
  %v5847 = vld [vmem:[%s4382 + $0x272] sm:$0xff]
  %v5848 = vld [vmem:[%s4382 + $0x27a] sm:$0xff]
  %v5849 = vld [vmem:[%s4382 + $0x28a] sm:$0xff]
  %v5850 = vld [vmem:[%s4382 + $0x292] sm:$0xff]
  %v5851 = vld [vmem:[%s4382 + $0x2a2] sm:$0xff]
  %v5852 = vld [vmem:[%s4382 + $0x2aa] sm:$0xff]
  %v5853 = vld [vmem:[%s4382 + $0x2ba] sm:$0xff]
  %v5854 = vld [vmem:[%s4382 + $0x2c2] sm:$0xff]
  %v5855 = vld [vmem:[%s4382 + $0x2d2] sm:$0xff]
  %v5856 = vld [vmem:[%s4382 + $0x2da] sm:$0xff]
  %v5857 = vld [vmem:[%s4382 + $0x2ea] sm:$0xff]
  %v5858 = vld [vmem:[%s4382 + $0x2f2] sm:$0xff]
  %v5859 = vld [vmem:[%s4382 + $0x302] sm:$0xff]
  %v5860 = vld [vmem:[%s4382 + $0x30a] sm:$0xff]
  %v5861 = vld [vmem:[%s4382 + $0x31a] sm:$0xff]
  %v5862 = vld [vmem:[%s4382 + $0x322] sm:$0xff]
  %v5864 = vsel %vm44, %v5799, 0
  %v5867 = vsel %vm44, %v5800, 0
  %v5870 = vsel %vm44, %v5801, 0
  %v5873 = vsel %vm44, %v5802, 0
  %v5876 = vsel %vm44, %v5803, 0
  %v5879 = vsel %vm44, %v5804, 0
  %v5882 = vsel %vm44, %v5805, 0
  %v5885 = vsel %vm44, %v5806, 0
  %v5888 = vsel %vm44, %v5807, 0
  %v5891 = vsel %vm44, %v5808, 0
  %v5894 = vsel %vm44, %v5809, 0
  %v5897 = vsel %vm44, %v5810, 0
  %v5900 = vsel %vm44, %v5811, 0
  %v5903 = vsel %vm44, %v5812, 0
  %v5906 = vsel %vm44, %v5813, 0
  %v5909 = vsel %vm44, %v5814, 0
  %v5912 = vsel %vm44, %v5815, 0
  %v5915 = vsel %vm44, %v5816, 0
  %v5918 = vsel %vm44, %v5817, 0
  %v5921 = vsel %vm44, %v5818, 0
  %v5924 = vsel %vm44, %v5819, 0
  %v5927 = vsel %vm44, %v5820, 0
  %v5930 = vsel %vm44, %v5821, 0
  %v5933 = vsel %vm44, %v5822, 0
  %v5936 = vsel %vm44, %v5823, 0
  %v5939 = vsel %vm44, %v5824, 0
  %v5942 = vsel %vm44, %v5825, 0
  %v5945 = vsel %vm44, %v5826, 0
  %v5948 = vsel %vm44, %v5827, 0
  %v5951 = vsel %vm44, %v5828, 0
  %v5954 = vsel %vm44, %v5829, 0
  %v5957 = vsel %vm44, %v5830, 0
  %v5960 = vsel %vm44, %v5831, 0
  %v5963 = vsel %vm44, %v5832, 0
  %v5966 = vsel %vm44, %v5833, 0
  %v5969 = vsel %vm44, %v5834, 0
  %v5972 = vsel %vm44, %v5835, 0
  %v5975 = vsel %vm44, %v5836, 0
  %v5978 = vsel %vm44, %v5837, 0
  %v5981 = vsel %vm44, %v5838, 0
  %v5984 = vsel %vm44, %v5839, 0
  %v5987 = vsel %vm44, %v5840, 0
  %v5990 = vsel %vm44, %v5841, 0
  %v5993 = vsel %vm44, %v5842, 0
  %v5996 = vsel %vm44, %v5843, 0
  %v5999 = vsel %vm44, %v5844, 0
  %v6002 = vsel %vm44, %v5845, 0
  %v6005 = vsel %vm44, %v5846, 0
  %v6008 = vsel %vm44, %v5847, 0
  %v6011 = vsel %vm44, %v5848, 0
  %v6014 = vsel %vm44, %v5849, 0
  %v6017 = vsel %vm44, %v5850, 0
  %v6020 = vsel %vm44, %v5851, 0
  %v6023 = vsel %vm44, %v5852, 0
  %v6026 = vsel %vm44, %v5853, 0
  %v6029 = vsel %vm44, %v5854, 0
  %v6032 = vsel %vm44, %v5855, 0
  %v6035 = vsel %vm44, %v5856, 0
  %v6038 = vsel %vm44, %v5857, 0
  %v6041 = vsel %vm44, %v5858, 0
  %v6044 = vsel %vm44, %v5859, 0
  %v6047 = vsel %vm44, %v5860, 0
  %v6050 = vsel %vm44, %v5861, 0
  %v6053 = vsel %vm44, %v5862, 0
  %v6056 = vsel %vm581, %v34, 0
  %6058 = vmatprep.subr.mxu0 0.0
  %6059 = vmatpush1.msra.mxu0 %v6056
  %6060 = vmatprep.subr.mxu0 0.0
  %6061 = vmatpush1.msra.mxu0 0.0
  %6062 = vmatprep.subr.mxu0 0.0
  %6063 = vmatpush1.msra.mxu0 0.0
  %6064 = vmatprep.subr.mxu0 0.0
  %6065 = vmatpush1.msra.mxu0 0.0
  %6066 = vmatprep.subr.mxu0 0.0
  %6067 = vmatpush1.msra.mxu0 0.0
  %6068 = vmatprep.subr.mxu0 0.0
  %6069 = vmatpush1.msra.mxu0 0.0
  %6070 = vmatprep.subr.mxu0 0.0
  %6071 = vmatpush1.msra.mxu0 0.0
  %6072 = vmatprep.subr.mxu0 0.0
  %6073 = vmatpush1.msra.mxu0 0.0
  %6074 = vmatprep.subr.mxu0 0.0
  %6075 = vmatpush1.msra.mxu0 0.0
  %6076 = vmatprep.subr.mxu0 0.0
  %6077 = vmatpush1.msra.mxu0 0.0
  %6078 = vmatprep.subr.mxu0 0.0
  %6079 = vmatpush1.msra.mxu0 0.0
  %6080 = vmatprep.subr.mxu0 0.0
  %6081 = vmatpush1.msra.mxu0 0.0
  %6082 = vmatprep.subr.mxu0 0.0
  %6083 = vmatpush1.msra.mxu0 0.0
  %6084 = vmatprep.subr.mxu0 0.0
  %6085 = vmatpush1.msra.mxu0 0.0
  %6086 = vmatprep.subr.mxu0 0.0
  %6087 = vmatpush1.msra.mxu0 0.0
  %6088 = vmatprep.subr.mxu0 0.0
  %6089 = vmatpush1.msra.mxu0 0.0
  %6090 = vmatprep.subr.mxu0 0.0
  %6091 = vmatpush1.msra.mxu0 0.0
  %6092 = vmatprep.subr.mxu0 0.0
  %6093 = vmatpush1.msra.mxu0 0.0
  %6094 = vmatprep.subr.mxu0 0.0
  %6095 = vmatpush1.msra.mxu0 0.0
  %6096 = vmatprep.subr.mxu0 0.0
  %6097 = vmatpush1.msra.mxu0 0.0
  %6098 = vmatprep.subr.mxu0 0.0
  %6099 = vmatpush1.msra.mxu0 0.0
  %6100 = vmatprep.subr.mxu0 0.0
  %6101 = vmatpush1.msra.mxu0 0.0
  %6102 = vmatprep.subr.mxu0 0.0
  %6103 = vmatpush1.msra.mxu0 0.0
  %6104 = vmatprep.subr.mxu0 0.0
  %6105 = vmatpush1.msra.mxu0 0.0
  %6106 = vmatprep.subr.mxu0 0.0
  %6107 = vmatpush1.msra.mxu0 0.0
  %6108 = vmatprep.subr.mxu0 0.0
  %6109 = vmatpush1.msra.mxu0 0.0
  %6110 = vmatprep.subr.mxu0 0.0
  %6111 = vmatpush1.msra.mxu0 0.0
  %6112 = vmatprep.subr.mxu0 0.0
  %6113 = vmatpush1.msra.mxu0 0.0
  %6114 = vmatprep.subr.mxu0 0.0
  %6115 = vmatpush1.msra.mxu0 0.0
  %6116 = vmatprep.subr.mxu0 0.0
  %6117 = vmatpush1.msra.mxu0 0.0
  %6118 = vmatprep.subr.mxu0 0.0
  %6119 = vmatpush1.msra.mxu0 0.0
  %6120 = vmatprep.subr.mxu0 0.0
  %6121 = vmatpush1.msra.mxu0 0.0
  %6122 = vmatprep.mubr.f32.mxu0 0.0
  %6123 = vmatmul.mubr.f32.gmra.mrb[0].mxu0 %v5864
  %v6124 = vpop.f32.mrb[0].mxu0
  %v6125 = vadd.f32 0.0, %v6124
  %v6126 = vpop.f32.mrb[0].mxu0
  %6127 = vmatprep.mubr.f32.mxu0 0.0
  %6128 = vmatmul.mubr.f32.gmra.mrb[0].mxu0 %v5867
  %v6129 = vpop.f32.mrb[0].mxu0
  %v6130 = vadd.f32 0.0, %v6129
  %v6131 = vpop.f32.mrb[0].mxu0
  %6132 = vmatprep.mubr.f32.mxu0 0.0
  %6133 = vmatmul.mubr.f32.gmra.mrb[0].mxu0 %v5870
  %v6134 = vpop.f32.mrb[0].mxu0
  %v6135 = vadd.f32 0.0, %v6134
  %v6136 = vpop.f32.mrb[0].mxu0
  %6137 = vmatprep.mubr.f32.mxu0 0.0
  %6138 = vmatmul.mubr.f32.gmra.mrb[0].mxu0 %v5873
  %v6139 = vpop.f32.mrb[0].mxu0
  %v6140 = vadd.f32 0.0, %v6139
  %v6141 = vpop.f32.mrb[0].mxu0
  %6142 = vmatprep.mubr.f32.mxu0 0.0
  %6143 = vmatmul.mubr.f32.gmra.mrb[0].mxu0 %v5876
  %v6144 = vpop.f32.mrb[0].mxu0
  %v6145 = vadd.f32 0.0, %v6144
  %v6146 = vpop.f32.mrb[0].mxu0
  %6147 = vmatprep.mubr.f32.mxu0 0.0
  %6148 = vmatmul.mubr.f32.gmra.mrb[0].mxu0 %v5879
  %v6149 = vpop.f32.mrb[0].mxu0
  %v6150 = vadd.f32 0.0, %v6149
  %v6151 = vpop.f32.mrb[0].mxu0
  %6152 = vmatprep.mubr.f32.mxu0 0.0
  %6153 = vmatmul.mubr.f32.gmra.mrb[0].mxu0 %v5882
  %v6154 = vpop.f32.mrb[0].mxu0
  %v6155 = vadd.f32 0.0, %v6154
  %v6156 = vpop.f32.mrb[0].mxu0
  %6157 = vmatprep.mubr.f32.mxu0 0.0
  %6158 = vmatmul.mubr.f32.gmra.mrb[0].mxu0 %v5885
  %v6159 = vpop.f32.mrb[0].mxu0
  %v6160 = vadd.f32 0.0, %v6159
  %v6161 = vpop.f32.mrb[0].mxu0
  %6162 = vmatprep.mubr.f32.mxu0 0.0
  %6163 = vmatmul.mubr.f32.gmra.mrb[0].mxu0 %v5888
  %v6164 = vpop.f32.mrb[0].mxu0
  %v6165 = vadd.f32 0.0, %v6164
  %v6166 = vpop.f32.mrb[0].mxu0
  %6167 = vmatprep.mubr.f32.mxu0 0.0
  %6168 = vmatmul.mubr.f32.gmra.mrb[0].mxu0 %v5891
  %v6169 = vpop.f32.mrb[0].mxu0
  %v6170 = vadd.f32 0.0, %v6169
  %v6171 = vpop.f32.mrb[0].mxu0
  %6172 = vmatprep.mubr.f32.mxu0 0.0
  %6173 = vmatmul.mubr.f32.gmra.mrb[0].mxu0 %v5894
  %v6174 = vpop.f32.mrb[0].mxu0
  %v6175 = vadd.f32 0.0, %v6174
  %v6176 = vpop.f32.mrb[0].mxu0
  %6177 = vmatprep.mubr.f32.mxu0 0.0
  %6178 = vmatmul.mubr.f32.gmra.mrb[0].mxu0 %v5897
  %v6179 = vpop.f32.mrb[0].mxu0
  %v6180 = vadd.f32 0.0, %v6179
  %v6181 = vpop.f32.mrb[0].mxu0
  %6182 = vmatprep.mubr.f32.mxu0 0.0
  %6183 = vmatmul.mubr.f32.gmra.mrb[0].mxu0 %v5900
  %v6184 = vpop.f32.mrb[0].mxu0
  %v6185 = vadd.f32 0.0, %v6184
  %v6186 = vpop.f32.mrb[0].mxu0
  %6187 = vmatprep.mubr.f32.mxu0 0.0
  %6188 = vmatmul.mubr.f32.gmra.mrb[0].mxu0 %v5903
  %v6189 = vpop.f32.mrb[0].mxu0
  %v6190 = vadd.f32 0.0, %v6189
  %v6191 = vpop.f32.mrb[0].mxu0
  %6192 = vmatprep.mubr.f32.mxu0 0.0
  %6193 = vmatmul.mubr.f32.gmra.mrb[0].mxu0 %v5906
  %v6194 = vpop.f32.mrb[0].mxu0
  %v6195 = vadd.f32 0.0, %v6194
  %v6196 = vpop.f32.mrb[0].mxu0
  %6197 = vmatprep.mubr.f32.mxu0 0.0
  %6198 = vmatmul.mubr.f32.gmra.mrb[0].mxu0 %v5909
  %v6199 = vpop.f32.mrb[0].mxu0
  %v6200 = vadd.f32 0.0, %v6199
  %v6201 = vpop.f32.mrb[0].mxu0
  %6202 = vmatprep.mubr.f32.mxu0 0.0
  %6203 = vmatmul.mubr.f32.gmra.mrb[0].mxu0 %v5912
  %v6204 = vpop.f32.mrb[0].mxu0
  %v6205 = vadd.f32 0.0, %v6204
  %v6206 = vpop.f32.mrb[0].mxu0
  %6207 = vmatprep.mubr.f32.mxu0 0.0
  %6208 = vmatmul.mubr.f32.gmra.mrb[0].mxu0 %v5915
  %v6209 = vpop.f32.mrb[0].mxu0
  %v6210 = vadd.f32 0.0, %v6209
  %v6211 = vpop.f32.mrb[0].mxu0
  %6212 = vmatprep.mubr.f32.mxu0 0.0
  %6213 = vmatmul.mubr.f32.gmra.mrb[0].mxu0 %v5918
  %v6214 = vpop.f32.mrb[0].mxu0
  %v6215 = vadd.f32 0.0, %v6214
  %v6216 = vpop.f32.mrb[0].mxu0
  %6217 = vmatprep.mubr.f32.mxu0 0.0
  %6218 = vmatmul.mubr.f32.gmra.mrb[0].mxu0 %v5921
  %v6219 = vpop.f32.mrb[0].mxu0
  %v6220 = vadd.f32 0.0, %v6219
  %v6221 = vpop.f32.mrb[0].mxu0
  %6222 = vmatprep.mubr.f32.mxu0 0.0
  %6223 = vmatmul.mubr.f32.gmra.mrb[0].mxu0 %v5924
  %v6224 = vpop.f32.mrb[0].mxu0
  %v6225 = vadd.f32 0.0, %v6224
  %v6226 = vpop.f32.mrb[0].mxu0
  %6227 = vmatprep.mubr.f32.mxu0 0.0
  %6228 = vmatmul.mubr.f32.gmra.mrb[0].mxu0 %v5927
  %v6229 = vpop.f32.mrb[0].mxu0
  %v6230 = vadd.f32 0.0, %v6229
  %v6231 = vpop.f32.mrb[0].mxu0
  %6232 = vmatprep.mubr.f32.mxu0 0.0
  %6233 = vmatmul.mubr.f32.gmra.mrb[0].mxu0 %v5930
  %v6234 = vpop.f32.mrb[0].mxu0
  %v6235 = vadd.f32 0.0, %v6234
  %v6236 = vpop.f32.mrb[0].mxu0
  %6237 = vmatprep.mubr.f32.mxu0 0.0
  %6238 = vmatmul.mubr.f32.gmra.mrb[0].mxu0 %v5933
  %v6239 = vpop.f32.mrb[0].mxu0
  %v6240 = vadd.f32 0.0, %v6239
  %v6241 = vpop.f32.mrb[0].mxu0
  %6242 = vmatprep.mubr.f32.mxu0 0.0
  %6243 = vmatmul.mubr.f32.gmra.mrb[0].mxu0 %v5936
  %v6244 = vpop.f32.mrb[0].mxu0
  %v6245 = vadd.f32 0.0, %v6244
  %v6246 = vpop.f32.mrb[0].mxu0
  %6247 = vmatprep.mubr.f32.mxu0 0.0
  %6248 = vmatmul.mubr.f32.gmra.mrb[0].mxu0 %v5939
  %v6249 = vpop.f32.mrb[0].mxu0
  %v6250 = vadd.f32 0.0, %v6249
  %v6251 = vpop.f32.mrb[0].mxu0
  %6252 = vmatprep.mubr.f32.mxu0 0.0
  %6253 = vmatmul.mubr.f32.gmra.mrb[0].mxu0 %v5942
  %v6254 = vpop.f32.mrb[0].mxu0
  %v6255 = vadd.f32 0.0, %v6254
  %v6256 = vpop.f32.mrb[0].mxu0
  %6257 = vmatprep.mubr.f32.mxu0 0.0
  %6258 = vmatmul.mubr.f32.gmra.mrb[0].mxu0 %v5945
  %v6259 = vpop.f32.mrb[0].mxu0
  %v6260 = vadd.f32 0.0, %v6259
  %v6261 = vpop.f32.mrb[0].mxu0
  %6262 = vmatprep.mubr.f32.mxu0 0.0
  %6263 = vmatmul.mubr.f32.gmra.mrb[0].mxu0 %v5948
  %v6264 = vpop.f32.mrb[0].mxu0
  %v6265 = vadd.f32 0.0, %v6264
  %v6266 = vpop.f32.mrb[0].mxu0
  %6267 = vmatprep.mubr.f32.mxu0 0.0
  %6268 = vmatmul.mubr.f32.gmra.mrb[0].mxu0 %v5951
  %v6269 = vpop.f32.mrb[0].mxu0
  %v6270 = vadd.f32 0.0, %v6269
  %v6271 = vpop.f32.mrb[0].mxu0
  %6272 = vmatprep.mubr.f32.mxu0 0.0
  %6273 = vmatmul.mubr.f32.gmra.mrb[0].mxu0 %v5954
  %v6274 = vpop.f32.mrb[0].mxu0
  %v6275 = vadd.f32 0.0, %v6274
  %v6276 = vpop.f32.mrb[0].mxu0
  %6277 = vmatprep.mubr.f32.mxu0 0.0
  %6278 = vmatmul.mubr.f32.gmra.mrb[0].mxu0 %v5957
  %v6279 = vpop.f32.mrb[0].mxu0
  %v6280 = vadd.f32 0.0, %v6279
  %v6281 = vpop.f32.mrb[0].mxu0
  %6282 = vmatprep.mubr.f32.mxu0 0.0
  %6283 = vmatmul.mubr.f32.gmra.mrb[0].mxu0 %v5960
  %v6284 = vpop.f32.mrb[0].mxu0
  %v6285 = vadd.f32 0.0, %v6284
  %v6286 = vpop.f32.mrb[0].mxu0
  %6287 = vmatprep.mubr.f32.mxu0 0.0
  %6288 = vmatmul.mubr.f32.gmra.mrb[0].mxu0 %v5963
  %v6289 = vpop.f32.mrb[0].mxu0
  %v6290 = vadd.f32 0.0, %v6289
  %v6291 = vpop.f32.mrb[0].mxu0
  %6292 = vmatprep.mubr.f32.mxu0 0.0
  %6293 = vmatmul.mubr.f32.gmra.mrb[0].mxu0 %v5966
  %v6294 = vpop.f32.mrb[0].mxu0
  %v6295 = vadd.f32 0.0, %v6294
  %v6296 = vpop.f32.mrb[0].mxu0
  %6297 = vmatprep.mubr.f32.mxu0 0.0
  %6298 = vmatmul.mubr.f32.gmra.mrb[0].mxu0 %v5969
  %v6299 = vpop.f32.mrb[0].mxu0
  %v6300 = vadd.f32 0.0, %v6299
  %v6301 = vpop.f32.mrb[0].mxu0
  %6302 = vmatprep.mubr.f32.mxu0 0.0
  %6303 = vmatmul.mubr.f32.gmra.mrb[0].mxu0 %v5972
  %v6304 = vpop.f32.mrb[0].mxu0
  %v6305 = vadd.f32 0.0, %v6304
  %v6306 = vpop.f32.mrb[0].mxu0
  %6307 = vmatprep.mubr.f32.mxu0 0.0
  %6308 = vmatmul.mubr.f32.gmra.mrb[0].mxu0 %v5975
  %v6309 = vpop.f32.mrb[0].mxu0
  %v6310 = vadd.f32 0.0, %v6309
  %v6311 = vpop.f32.mrb[0].mxu0
  %6312 = vmatprep.mubr.f32.mxu0 0.0
  %6313 = vmatmul.mubr.f32.gmra.mrb[0].mxu0 %v5978
  %v6314 = vpop.f32.mrb[0].mxu0
  %v6315 = vadd.f32 0.0, %v6314
  %v6316 = vpop.f32.mrb[0].mxu0
  %6317 = vmatprep.mubr.f32.mxu0 0.0
  %6318 = vmatmul.mubr.f32.gmra.mrb[0].mxu0 %v5981
  %v6319 = vpop.f32.mrb[0].mxu0
  %v6320 = vadd.f32 0.0, %v6319
  %v6321 = vpop.f32.mrb[0].mxu0
  %6322 = vmatprep.mubr.f32.mxu0 0.0
  %6323 = vmatmul.mubr.f32.gmra.mrb[0].mxu0 %v5984
  %v6324 = vpop.f32.mrb[0].mxu0
  %v6325 = vadd.f32 0.0, %v6324
  %v6326 = vpop.f32.mrb[0].mxu0
  %6327 = vmatprep.mubr.f32.mxu0 0.0
  %6328 = vmatmul.mubr.f32.gmra.mrb[0].mxu0 %v5987
  %v6329 = vpop.f32.mrb[0].mxu0
  %v6330 = vadd.f32 0.0, %v6329
  %v6331 = vpop.f32.mrb[0].mxu0
  %6332 = vmatprep.mubr.f32.mxu0 0.0
  %6333 = vmatmul.mubr.f32.gmra.mrb[0].mxu0 %v5990
  %v6334 = vpop.f32.mrb[0].mxu0
  %v6335 = vadd.f32 0.0, %v6334
  %v6336 = vpop.f32.mrb[0].mxu0
  %6337 = vmatprep.mubr.f32.mxu0 0.0
  %6338 = vmatmul.mubr.f32.gmra.mrb[0].mxu0 %v5993
  %v6339 = vpop.f32.mrb[0].mxu0
  %v6340 = vadd.f32 0.0, %v6339
  %v6341 = vpop.f32.mrb[0].mxu0
  %6342 = vmatprep.mubr.f32.mxu0 0.0
  %6343 = vmatmul.mubr.f32.gmra.mrb[0].mxu0 %v5996
  %v6344 = vpop.f32.mrb[0].mxu0
  %v6345 = vadd.f32 0.0, %v6344
  %v6346 = vpop.f32.mrb[0].mxu0
  %6347 = vmatprep.mubr.f32.mxu0 0.0
  %6348 = vmatmul.mubr.f32.gmra.mrb[0].mxu0 %v5999
  %v6349 = vpop.f32.mrb[0].mxu0
  %v6350 = vadd.f32 0.0, %v6349
  %v6351 = vpop.f32.mrb[0].mxu0
  %6352 = vmatprep.mubr.f32.mxu0 0.0
  %6353 = vmatmul.mubr.f32.gmra.mrb[0].mxu0 %v6002
  %v6354 = vpop.f32.mrb[0].mxu0
  %v6355 = vadd.f32 0.0, %v6354
  %v6356 = vpop.f32.mrb[0].mxu0
  %6357 = vmatprep.mubr.f32.mxu0 0.0
  %6358 = vmatmul.mubr.f32.gmra.mrb[0].mxu0 %v6005
  %v6359 = vpop.f32.mrb[0].mxu0
  %v6360 = vadd.f32 0.0, %v6359
  %v6361 = vpop.f32.mrb[0].mxu0
  %6362 = vmatprep.mubr.f32.mxu0 0.0
  %6363 = vmatmul.mubr.f32.gmra.mrb[0].mxu0 %v6008
  %v6364 = vpop.f32.mrb[0].mxu0
  %v6365 = vadd.f32 0.0, %v6364
  %v6366 = vpop.f32.mrb[0].mxu0
  %6367 = vmatprep.mubr.f32.mxu0 0.0
  %6368 = vmatmul.mubr.f32.gmra.mrb[0].mxu0 %v6011
  %v6369 = vpop.f32.mrb[0].mxu0
  %v6370 = vadd.f32 0.0, %v6369
  %v6371 = vpop.f32.mrb[0].mxu0
  %6372 = vmatprep.mubr.f32.mxu0 0.0
  %6373 = vmatmul.mubr.f32.gmra.mrb[0].mxu0 %v6014
  %v6374 = vpop.f32.mrb[0].mxu0
  %v6375 = vadd.f32 0.0, %v6374
  %v6376 = vpop.f32.mrb[0].mxu0
  %6377 = vmatprep.mubr.f32.mxu0 0.0
  %6378 = vmatmul.mubr.f32.gmra.mrb[0].mxu0 %v6017
  %v6379 = vpop.f32.mrb[0].mxu0
  %v6380 = vadd.f32 0.0, %v6379
  %v6381 = vpop.f32.mrb[0].mxu0
  %6382 = vmatprep.mubr.f32.mxu0 0.0
  %6383 = vmatmul.mubr.f32.gmra.mrb[0].mxu0 %v6020
  %v6384 = vpop.f32.mrb[0].mxu0
  %v6385 = vadd.f32 0.0, %v6384
  %v6386 = vpop.f32.mrb[0].mxu0
  %6387 = vmatprep.mubr.f32.mxu0 0.0
  %6388 = vmatmul.mubr.f32.gmra.mrb[0].mxu0 %v6023
  %v6389 = vpop.f32.mrb[0].mxu0
  %v6390 = vadd.f32 0.0, %v6389
  %v6391 = vpop.f32.mrb[0].mxu0
  %6392 = vmatprep.mubr.f32.mxu0 0.0
  %6393 = vmatmul.mubr.f32.gmra.mrb[0].mxu0 %v6026
  %v6394 = vpop.f32.mrb[0].mxu0
  %v6395 = vadd.f32 0.0, %v6394
  %v6396 = vpop.f32.mrb[0].mxu0
  %6397 = vmatprep.mubr.f32.mxu0 0.0
  %6398 = vmatmul.mubr.f32.gmra.mrb[0].mxu0 %v6029
  %v6399 = vpop.f32.mrb[0].mxu0
  %v6400 = vadd.f32 0.0, %v6399
  %v6401 = vpop.f32.mrb[0].mxu0
  %6402 = vmatprep.mubr.f32.mxu0 0.0
  %6403 = vmatmul.mubr.f32.gmra.mrb[0].mxu0 %v6032
  %v6404 = vpop.f32.mrb[0].mxu0
  %v6405 = vadd.f32 0.0, %v6404
  %v6406 = vpop.f32.mrb[0].mxu0
  %6407 = vmatprep.mubr.f32.mxu0 0.0
  %6408 = vmatmul.mubr.f32.gmra.mrb[0].mxu0 %v6035
  %v6409 = vpop.f32.mrb[0].mxu0
  %v6410 = vadd.f32 0.0, %v6409
  %v6411 = vpop.f32.mrb[0].mxu0
  %6412 = vmatprep.mubr.f32.mxu0 0.0
  %6413 = vmatmul.mubr.f32.gmra.mrb[0].mxu0 %v6038
  %v6414 = vpop.f32.mrb[0].mxu0
  %v6415 = vadd.f32 0.0, %v6414
  %v6416 = vpop.f32.mrb[0].mxu0
  %6417 = vmatprep.mubr.f32.mxu0 0.0
  %6418 = vmatmul.mubr.f32.gmra.mrb[0].mxu0 %v6041
  %v6419 = vpop.f32.mrb[0].mxu0
  %v6420 = vadd.f32 0.0, %v6419
  %v6421 = vpop.f32.mrb[0].mxu0
  %6422 = vmatprep.mubr.f32.mxu0 0.0
  %6423 = vmatmul.mubr.f32.gmra.mrb[0].mxu0 %v6044
  %v6424 = vpop.f32.mrb[0].mxu0
  %v6425 = vadd.f32 0.0, %v6424
  %v6426 = vpop.f32.mrb[0].mxu0
  %6427 = vmatprep.mubr.f32.mxu0 0.0
  %6428 = vmatmul.mubr.f32.gmra.mrb[0].mxu0 %v6047
  %v6429 = vpop.f32.mrb[0].mxu0
  %v6430 = vadd.f32 0.0, %v6429
  %v6431 = vpop.f32.mrb[0].mxu0
  %6432 = vmatprep.mubr.f32.mxu0 0.0
  %6433 = vmatmul.mubr.f32.gmra.mrb[0].mxu0 %v6050
  %v6434 = vpop.f32.mrb[0].mxu0
  %v6435 = vadd.f32 0.0, %v6434
  %v6436 = vpop.f32.mrb[0].mxu0
  %6437 = vmatprep.mubr.f32.mxu0 0.0
  %6438 = vmatmul.mubr.f32.gmra.mrb[0].mxu0 %v6053
  %v6439 = vpop.f32.mrb[0].mxu0
  %v6440 = vadd.f32 0.0, %v6439
  %v6441 = vpop.f32.mrb[0].mxu0
  %6442 = vdwg.mxu0
  %v6443 = vadd.f32 %v5735, %v6125
  %v6444 = vadd.f32 %v5736, %v6130
  %v6445 = vadd.f32 %v5737, %v6135
  %v6446 = vadd.f32 %v5738, %v6140
  %v6447 = vadd.f32 %v5739, %v6145
  %v6448 = vadd.f32 %v5740, %v6150
  %v6449 = vadd.f32 %v5741, %v6155
  %v6450 = vadd.f32 %v5742, %v6160
  %v6451 = vadd.f32 %v5743, %v6165
  %v6452 = vadd.f32 %v5744, %v6170
  %v6453 = vadd.f32 %v5745, %v6175
  %v6454 = vadd.f32 %v5746, %v6180
  %v6455 = vadd.f32 %v5747, %v6185
  %v6456 = vadd.f32 %v5748, %v6190
  %v6457 = vadd.f32 %v5749, %v6195
  %v6458 = vadd.f32 %v5750, %v6200
  %v6459 = vadd.f32 %v5751, %v6205
  %v6460 = vadd.f32 %v5752, %v6210
  %v6461 = vadd.f32 %v5753, %v6215
  %v6462 = vadd.f32 %v5754, %v6220
  %v6463 = vadd.f32 %v5755, %v6225
  %v6464 = vadd.f32 %v5756, %v6230
  %v6465 = vadd.f32 %v5757, %v6235
  %v6466 = vadd.f32 %v5758, %v6240
  %v6467 = vadd.f32 %v5759, %v6245
  %v6468 = vadd.f32 %v5760, %v6250
  %v6469 = vadd.f32 %v5761, %v6255
  %v6470 = vadd.f32 %v5762, %v6260
  %v6471 = vadd.f32 %v5763, %v6265
  %v6472 = vadd.f32 %v5764, %v6270
  %v6473 = vadd.f32 %v5765, %v6275
  %v6474 = vadd.f32 %v5766, %v6280
  %v6475 = vadd.f32 %v5767, %v6285
  %v6476 = vadd.f32 %v5768, %v6290
  %v6477 = vadd.f32 %v5769, %v6295
  %v6478 = vadd.f32 %v5770, %v6300
  %v6479 = vadd.f32 %v5771, %v6305
  %v6480 = vadd.f32 %v5772, %v6310
  %v6481 = vadd.f32 %v5773, %v6315
  %v6482 = vadd.f32 %v5774, %v6320
  %v6483 = vadd.f32 %v5775, %v6325
  %v6484 = vadd.f32 %v5776, %v6330
  %v6485 = vadd.f32 %v5777, %v6335
  %v6486 = vadd.f32 %v5778, %v6340
  %v6487 = vadd.f32 %v5779, %v6345
  %v6488 = vadd.f32 %v5780, %v6350
  %v6489 = vadd.f32 %v5781, %v6355
  %v6490 = vadd.f32 %v5782, %v6360
  %v6491 = vadd.f32 %v5783, %v6365
  %v6492 = vadd.f32 %v5784, %v6370
  %v6493 = vadd.f32 %v5785, %v6375
  %v6494 = vadd.f32 %v5786, %v6380
  %v6495 = vadd.f32 %v5787, %v6385
  %v6496 = vadd.f32 %v5788, %v6390
  %v6497 = vadd.f32 %v5789, %v6395
  %v6498 = vadd.f32 %v5790, %v6400
  %v6499 = vadd.f32 %v5791, %v6405
  %v6500 = vadd.f32 %v5792, %v6410
  %v6501 = vadd.f32 %v5793, %v6415
  %v6502 = vadd.f32 %v5794, %v6420
  %v6503 = vadd.f32 %v5795, %v6425
  %v6504 = vadd.f32 %v5796, %v6430
  %v6505 = vadd.f32 %v5797, %v6435
  %v6506 = vadd.f32 %v5798, %v6440
  %v6507 = vsel %vm44, %v6443, 0.0
  %v6508 = vsel %vm44, %v6444, 0.0
  %v6509 = vadd.f32 %v6507, %v6508
  %v6510 = vsel %vm44, %v6445, 0.0
  %v6511 = vadd.f32 %v6509, %v6510
  %v6512 = vsel %vm44, %v6446, 0.0
  %v6513 = vadd.f32 %v6511, %v6512
  %v6514 = vsel %vm44, %v6447, 0.0
  %v6515 = vadd.f32 %v6513, %v6514
  %v6516 = vsel %vm44, %v6448, 0.0
  %v6517 = vadd.f32 %v6515, %v6516
  %v6518 = vsel %vm44, %v6449, 0.0
  %v6519 = vadd.f32 %v6517, %v6518
  %v6520 = vsel %vm44, %v6450, 0.0
  %v6521 = vadd.f32 %v6519, %v6520
  %v6522 = vsel %vm44, %v6451, 0.0
  %v6523 = vadd.f32 %v6521, %v6522
  %v6524 = vsel %vm44, %v6452, 0.0
  %v6525 = vadd.f32 %v6523, %v6524
  %v6526 = vsel %vm44, %v6453, 0.0
  %v6527 = vadd.f32 %v6525, %v6526
  %v6528 = vsel %vm44, %v6454, 0.0
  %v6529 = vadd.f32 %v6527, %v6528
  %v6530 = vsel %vm44, %v6455, 0.0
  %v6531 = vadd.f32 %v6529, %v6530
  %v6532 = vsel %vm44, %v6456, 0.0
  %v6533 = vadd.f32 %v6531, %v6532
  %v6534 = vsel %vm44, %v6457, 0.0
  %v6535 = vadd.f32 %v6533, %v6534
  %v6536 = vsel %vm44, %v6458, 0.0
  %v6537 = vadd.f32 %v6535, %v6536
  %v6538 = vsel %vm44, %v6459, 0.0
  %v6539 = vadd.f32 %v6537, %v6538
  %v6540 = vsel %vm44, %v6460, 0.0
  %v6541 = vadd.f32 %v6539, %v6540
  %v6542 = vsel %vm44, %v6461, 0.0
  %v6543 = vadd.f32 %v6541, %v6542
  %v6544 = vsel %vm44, %v6462, 0.0
  %v6545 = vadd.f32 %v6543, %v6544
  %v6546 = vsel %vm44, %v6463, 0.0
  %v6547 = vadd.f32 %v6545, %v6546
  %v6548 = vsel %vm44, %v6464, 0.0
  %v6549 = vadd.f32 %v6547, %v6548
  %v6550 = vsel %vm44, %v6465, 0.0
  %v6551 = vadd.f32 %v6549, %v6550
  %v6552 = vsel %vm44, %v6466, 0.0
  %v6553 = vadd.f32 %v6551, %v6552
  %v6554 = vsel %vm44, %v6467, 0.0
  %v6555 = vadd.f32 %v6553, %v6554
  %v6556 = vsel %vm44, %v6468, 0.0
  %v6557 = vadd.f32 %v6555, %v6556
  %v6558 = vsel %vm44, %v6469, 0.0
  %v6559 = vadd.f32 %v6557, %v6558
  %v6560 = vsel %vm44, %v6470, 0.0
  %v6561 = vadd.f32 %v6559, %v6560
  %v6562 = vsel %vm44, %v6471, 0.0
  %v6563 = vadd.f32 %v6561, %v6562
  %v6564 = vsel %vm44, %v6472, 0.0
  %v6565 = vadd.f32 %v6563, %v6564
  %v6566 = vsel %vm44, %v6473, 0.0
  %v6567 = vadd.f32 %v6565, %v6566
  %v6568 = vsel %vm44, %v6474, 0.0
  %v6569 = vadd.f32 %v6567, %v6568
  %v6570 = vsel %vm44, %v6475, 0.0
  %v6571 = vadd.f32 %v6569, %v6570
  %v6572 = vsel %vm44, %v6476, 0.0
  %v6573 = vadd.f32 %v6571, %v6572
  %v6574 = vsel %vm44, %v6477, 0.0
  %v6575 = vadd.f32 %v6573, %v6574
  %v6576 = vsel %vm44, %v6478, 0.0
  %v6577 = vadd.f32 %v6575, %v6576
  %v6578 = vsel %vm44, %v6479, 0.0
  %v6579 = vadd.f32 %v6577, %v6578
  %v6580 = vsel %vm44, %v6480, 0.0
  %v6581 = vadd.f32 %v6579, %v6580
  %v6582 = vsel %vm44, %v6481, 0.0
  %v6583 = vadd.f32 %v6581, %v6582
  %v6584 = vsel %vm44, %v6482, 0.0
  %v6585 = vadd.f32 %v6583, %v6584
  %v6586 = vsel %vm44, %v6483, 0.0
  %v6587 = vadd.f32 %v6585, %v6586
  %v6588 = vsel %vm44, %v6484, 0.0
  %v6589 = vadd.f32 %v6587, %v6588
  %v6590 = vsel %vm44, %v6485, 0.0
  %v6591 = vadd.f32 %v6589, %v6590
  %v6592 = vsel %vm44, %v6486, 0.0
  %v6593 = vadd.f32 %v6591, %v6592
  %v6594 = vsel %vm44, %v6487, 0.0
  %v6595 = vadd.f32 %v6593, %v6594
  %v6596 = vsel %vm44, %v6488, 0.0
  %v6597 = vadd.f32 %v6595, %v6596
  %v6598 = vsel %vm44, %v6489, 0.0
  %v6599 = vadd.f32 %v6597, %v6598
  %v6600 = vsel %vm44, %v6490, 0.0
  %v6601 = vadd.f32 %v6599, %v6600
  %v6602 = vsel %vm44, %v6491, 0.0
  %v6603 = vadd.f32 %v6601, %v6602
  %v6604 = vsel %vm44, %v6492, 0.0
  %v6605 = vadd.f32 %v6603, %v6604
  %v6606 = vsel %vm44, %v6493, 0.0
  %v6607 = vadd.f32 %v6605, %v6606
  %v6608 = vsel %vm44, %v6494, 0.0
  %v6609 = vadd.f32 %v6607, %v6608
  %v6610 = vsel %vm44, %v6495, 0.0
  %v6611 = vadd.f32 %v6609, %v6610
  %v6612 = vsel %vm44, %v6496, 0.0
  %v6613 = vadd.f32 %v6611, %v6612
  %v6614 = vsel %vm44, %v6497, 0.0
  %v6615 = vadd.f32 %v6613, %v6614
  %v6616 = vsel %vm44, %v6498, 0.0
  %v6617 = vadd.f32 %v6615, %v6616
  %v6618 = vsel %vm44, %v6499, 0.0
  %v6619 = vadd.f32 %v6617, %v6618
  %v6620 = vsel %vm44, %v6500, 0.0
  %v6621 = vadd.f32 %v6619, %v6620
  %v6622 = vsel %vm44, %v6501, 0.0
  %v6623 = vadd.f32 %v6621, %v6622
  %v6624 = vsel %vm44, %v6502, 0.0
  %v6625 = vadd.f32 %v6623, %v6624
  %v6626 = vsel %vm44, %v6503, 0.0
  %v6627 = vadd.f32 %v6625, %v6626
  %v6628 = vsel %vm44, %v6504, 0.0
  %v6629 = vadd.f32 %v6627, %v6628
  %v6630 = vsel %vm44, %v6505, 0.0
  %v6631 = vadd.f32 %v6629, %v6630
  %v6632 = vsel %vm44, %v6506, 0.0
  %v6633 = vadd.f32 %v6631, %v6632
  %v6634 = vrot.slane %v6633, 4
  %v6635 = vadd.f32 %v6633, %v6634
  %v6636 = vrot.slane %v6635, 2
  %v6637 = vadd.f32 %v6635, %v6636
  %v6638 = vrot.slane %v6637, 1
  %v6639 = vadd.f32 %v6637, %v6638
  %v6640 = vmul.f32 %v6443, %v6443
  %v6641 = vmul.f32 %v6444, %v6444
  %v6642 = vmul.f32 %v6445, %v6445
  %v6643 = vmul.f32 %v6446, %v6446
  %v6644 = vmul.f32 %v6447, %v6447
  %v6645 = vmul.f32 %v6448, %v6448
  %v6646 = vmul.f32 %v6449, %v6449
  %v6647 = vmul.f32 %v6450, %v6450
  %v6648 = vmul.f32 %v6451, %v6451
  %v6649 = vmul.f32 %v6452, %v6452
  %v6650 = vmul.f32 %v6453, %v6453
  %v6651 = vmul.f32 %v6454, %v6454
  %v6652 = vmul.f32 %v6455, %v6455
  %v6653 = vmul.f32 %v6456, %v6456
  %v6654 = vmul.f32 %v6457, %v6457
  %v6655 = vmul.f32 %v6458, %v6458
  %v6656 = vmul.f32 %v6459, %v6459
  %v6657 = vmul.f32 %v6460, %v6460
  %v6658 = vmul.f32 %v6461, %v6461
  %v6659 = vmul.f32 %v6462, %v6462
  %v6660 = vmul.f32 %v6463, %v6463
  %v6661 = vmul.f32 %v6464, %v6464
  %v6662 = vmul.f32 %v6465, %v6465
  %v6663 = vmul.f32 %v6466, %v6466
  %v6664 = vmul.f32 %v6467, %v6467
  %v6665 = vmul.f32 %v6468, %v6468
  %v6666 = vmul.f32 %v6469, %v6469
  %v6667 = vmul.f32 %v6470, %v6470
  %v6668 = vmul.f32 %v6471, %v6471
  %v6669 = vmul.f32 %v6472, %v6472
  %v6670 = vmul.f32 %v6473, %v6473
  %v6671 = vmul.f32 %v6474, %v6474
  %v6672 = vmul.f32 %v6475, %v6475
  %v6673 = vmul.f32 %v6476, %v6476
  %v6674 = vmul.f32 %v6477, %v6477
  %v6675 = vmul.f32 %v6478, %v6478
  %v6676 = vmul.f32 %v6479, %v6479
  %v6677 = vmul.f32 %v6480, %v6480
  %v6678 = vmul.f32 %v6481, %v6481
  %v6679 = vmul.f32 %v6482, %v6482
  %v6680 = vmul.f32 %v6483, %v6483
  %v6681 = vmul.f32 %v6484, %v6484
  %v6682 = vmul.f32 %v6485, %v6485
  %v6683 = vmul.f32 %v6486, %v6486
  %v6684 = vmul.f32 %v6487, %v6487
  %v6685 = vmul.f32 %v6488, %v6488
  %v6686 = vmul.f32 %v6489, %v6489
  %v6687 = vmul.f32 %v6490, %v6490
  %v6688 = vmul.f32 %v6491, %v6491
  %v6689 = vmul.f32 %v6492, %v6492
  %v6690 = vmul.f32 %v6493, %v6493
  %v6691 = vmul.f32 %v6494, %v6494
  %v6692 = vmul.f32 %v6495, %v6495
  %v6693 = vmul.f32 %v6496, %v6496
  %v6694 = vmul.f32 %v6497, %v6497
  %v6695 = vmul.f32 %v6498, %v6498
  %v6696 = vmul.f32 %v6499, %v6499
  %v6697 = vmul.f32 %v6500, %v6500
  %v6698 = vmul.f32 %v6501, %v6501
  %v6699 = vmul.f32 %v6502, %v6502
  %v6700 = vmul.f32 %v6503, %v6503
  %v6701 = vmul.f32 %v6504, %v6504
  %v6702 = vmul.f32 %v6505, %v6505
  %v6703 = vmul.f32 %v6506, %v6506
  %v6704 = vsel %vm44, %v6640, 0.0
  %v6705 = vsel %vm44, %v6641, 0.0
  %v6706 = vadd.f32 %v6704, %v6705
  %v6707 = vsel %vm44, %v6642, 0.0
  %v6708 = vadd.f32 %v6706, %v6707
  %v6709 = vsel %vm44, %v6643, 0.0
  %v6710 = vadd.f32 %v6708, %v6709
  %v6711 = vsel %vm44, %v6644, 0.0
  %v6712 = vadd.f32 %v6710, %v6711
  %v6713 = vsel %vm44, %v6645, 0.0
  %v6714 = vadd.f32 %v6712, %v6713
  %v6715 = vsel %vm44, %v6646, 0.0
  %v6716 = vadd.f32 %v6714, %v6715
  %v6717 = vsel %vm44, %v6647, 0.0
  %v6718 = vadd.f32 %v6716, %v6717
  %v6719 = vsel %vm44, %v6648, 0.0
  %v6720 = vadd.f32 %v6718, %v6719
  %v6721 = vsel %vm44, %v6649, 0.0
  %v6722 = vadd.f32 %v6720, %v6721
  %v6723 = vsel %vm44, %v6650, 0.0
  %v6724 = vadd.f32 %v6722, %v6723
  %v6725 = vsel %vm44, %v6651, 0.0
  %v6726 = vadd.f32 %v6724, %v6725
  %v6727 = vsel %vm44, %v6652, 0.0
  %v6728 = vadd.f32 %v6726, %v6727
  %v6729 = vsel %vm44, %v6653, 0.0
  %v6730 = vadd.f32 %v6728, %v6729
  %v6731 = vsel %vm44, %v6654, 0.0
  %v6732 = vadd.f32 %v6730, %v6731
  %v6733 = vsel %vm44, %v6655, 0.0
  %v6734 = vadd.f32 %v6732, %v6733
  %v6735 = vsel %vm44, %v6656, 0.0
  %v6736 = vadd.f32 %v6734, %v6735
  %v6737 = vsel %vm44, %v6657, 0.0
  %v6738 = vadd.f32 %v6736, %v6737
  %v6739 = vsel %vm44, %v6658, 0.0
  %v6740 = vadd.f32 %v6738, %v6739
  %v6741 = vsel %vm44, %v6659, 0.0
  %v6742 = vadd.f32 %v6740, %v6741
  %v6743 = vsel %vm44, %v6660, 0.0
  %v6744 = vadd.f32 %v6742, %v6743
  %v6745 = vsel %vm44, %v6661, 0.0
  %v6746 = vadd.f32 %v6744, %v6745
  %v6747 = vsel %vm44, %v6662, 0.0
  %v6748 = vadd.f32 %v6746, %v6747
  %v6749 = vsel %vm44, %v6663, 0.0
  %v6750 = vadd.f32 %v6748, %v6749
  %v6751 = vsel %vm44, %v6664, 0.0
  %v6752 = vadd.f32 %v6750, %v6751
  %v6753 = vsel %vm44, %v6665, 0.0
  %v6754 = vadd.f32 %v6752, %v6753
  %v6755 = vsel %vm44, %v6666, 0.0
  %v6756 = vadd.f32 %v6754, %v6755
  %v6757 = vsel %vm44, %v6667, 0.0
  %v6758 = vadd.f32 %v6756, %v6757
  %v6759 = vsel %vm44, %v6668, 0.0
  %v6760 = vadd.f32 %v6758, %v6759
  %v6761 = vsel %vm44, %v6669, 0.0
  %v6762 = vadd.f32 %v6760, %v6761
  %v6763 = vsel %vm44, %v6670, 0.0
  %v6764 = vadd.f32 %v6762, %v6763
  %v6765 = vsel %vm44, %v6671, 0.0
  %v6766 = vadd.f32 %v6764, %v6765
  %v6767 = vsel %vm44, %v6672, 0.0
  %v6768 = vadd.f32 %v6766, %v6767
  %v6769 = vsel %vm44, %v6673, 0.0
  %v6770 = vadd.f32 %v6768, %v6769
  %v6771 = vsel %vm44, %v6674, 0.0
  %v6772 = vadd.f32 %v6770, %v6771
  %v6773 = vsel %vm44, %v6675, 0.0
  %v6774 = vadd.f32 %v6772, %v6773
  %v6775 = vsel %vm44, %v6676, 0.0
  %v6776 = vadd.f32 %v6774, %v6775
  %v6777 = vsel %vm44, %v6677, 0.0
  %v6778 = vadd.f32 %v6776, %v6777
  %v6779 = vsel %vm44, %v6678, 0.0
  %v6780 = vadd.f32 %v6778, %v6779
  %v6781 = vsel %vm44, %v6679, 0.0
  %v6782 = vadd.f32 %v6780, %v6781
  %v6783 = vsel %vm44, %v6680, 0.0
  %v6784 = vadd.f32 %v6782, %v6783
  %v6785 = vsel %vm44, %v6681, 0.0
  %v6786 = vadd.f32 %v6784, %v6785
  %v6787 = vsel %vm44, %v6682, 0.0
  %v6788 = vadd.f32 %v6786, %v6787
  %v6789 = vsel %vm44, %v6683, 0.0
  %v6790 = vadd.f32 %v6788, %v6789
  %v6791 = vsel %vm44, %v6684, 0.0
  %v6792 = vadd.f32 %v6790, %v6791
  %v6793 = vsel %vm44, %v6685, 0.0
  %v6794 = vadd.f32 %v6792, %v6793
  %v6795 = vsel %vm44, %v6686, 0.0
  %v6796 = vadd.f32 %v6794, %v6795
  %v6797 = vsel %vm44, %v6687, 0.0
  %v6798 = vadd.f32 %v6796, %v6797
  %v6799 = vsel %vm44, %v6688, 0.0
  %v6800 = vadd.f32 %v6798, %v6799
  %v6801 = vsel %vm44, %v6689, 0.0
  %v6802 = vadd.f32 %v6800, %v6801
  %v6803 = vsel %vm44, %v6690, 0.0
  %v6804 = vadd.f32 %v6802, %v6803
  %v6805 = vsel %vm44, %v6691, 0.0
  %v6806 = vadd.f32 %v6804, %v6805
  %v6807 = vsel %vm44, %v6692, 0.0
  %v6808 = vadd.f32 %v6806, %v6807
  %v6809 = vsel %vm44, %v6693, 0.0
  %v6810 = vadd.f32 %v6808, %v6809
  %v6811 = vsel %vm44, %v6694, 0.0
  %v6812 = vadd.f32 %v6810, %v6811
  %v6813 = vsel %vm44, %v6695, 0.0
  %v6814 = vadd.f32 %v6812, %v6813
  %v6815 = vsel %vm44, %v6696, 0.0
  %v6816 = vadd.f32 %v6814, %v6815
  %v6817 = vsel %vm44, %v6697, 0.0
  %v6818 = vadd.f32 %v6816, %v6817
  %v6819 = vsel %vm44, %v6698, 0.0
  %v6820 = vadd.f32 %v6818, %v6819
  %v6821 = vsel %vm44, %v6699, 0.0
  %v6822 = vadd.f32 %v6820, %v6821
  %v6823 = vsel %vm44, %v6700, 0.0
  %v6824 = vadd.f32 %v6822, %v6823
  %v6825 = vsel %vm44, %v6701, 0.0
  %v6826 = vadd.f32 %v6824, %v6825
  %v6827 = vsel %vm44, %v6702, 0.0
  %v6828 = vadd.f32 %v6826, %v6827
  %v6829 = vsel %vm44, %v6703, 0.0
  %v6830 = vadd.f32 %v6828, %v6829
  %v6831 = vrot.slane %v6830, 4
  %v6832 = vadd.f32 %v6830, %v6831
  %v6833 = vrot.slane %v6832, 2
  %v6834 = vadd.f32 %v6832, %v6833
  %v6835 = vrot.slane %v6834, 1
  %v6836 = vadd.f32 %v6834, %v6835
  %v6837 = vmul.f32 %v6639, 0.001953125
  %v6838 = vmul.f32 %v6836, 0.001953125
  %v6839 = vmul.f32 %v6837, %v6837
  %v6840 = vsub.f32 %v6838, %v6839
  %v6841 = vld [vmem:[%s3] sm:$0x1]
  %v6842 = vadd.f32 %v6840, 1e-05
  %v6843 = vrsqrt.pop %v6842
  %v6844 = vmul.f32 %v6841, %v6843
  %v6845 = vld [vmem:[%s4] sm:$0x1]
  %v6846 = vmul.f32 %v6837, %v6844
  %v6847 = vsub.f32 %v6845, %v6846
  %v6849 = vlaneseq
  %v6850 = vshrl.u32 %v6849, 7
  %v6851 = vsub.s32 0, %v6850
  %v6852 = vrot.slane %v6844, %v6851
  %v6854 = vmul.f32 %v6443, %v6852
  %v6855 = vmul.f32 %v6444, %v6852
  %v6856 = vmul.f32 %v6445, %v6852
  %v6857 = vmul.f32 %v6446, %v6852
  %v6858 = vmul.f32 %v6447, %v6852
  %v6859 = vmul.f32 %v6448, %v6852
  %v6860 = vmul.f32 %v6449, %v6852
  %v6861 = vmul.f32 %v6450, %v6852
  %v6862 = vmul.f32 %v6451, %v6852
  %v6863 = vmul.f32 %v6452, %v6852
  %v6864 = vmul.f32 %v6453, %v6852
  %v6865 = vmul.f32 %v6454, %v6852
  %v6866 = vmul.f32 %v6455, %v6852
  %v6867 = vmul.f32 %v6456, %v6852
  %v6868 = vmul.f32 %v6457, %v6852
  %v6869 = vmul.f32 %v6458, %v6852
  %v6870 = vmul.f32 %v6459, %v6852
  %v6871 = vmul.f32 %v6460, %v6852
  %v6872 = vmul.f32 %v6461, %v6852
  %v6873 = vmul.f32 %v6462, %v6852
  %v6874 = vmul.f32 %v6463, %v6852
  %v6875 = vmul.f32 %v6464, %v6852
  %v6876 = vmul.f32 %v6465, %v6852
  %v6877 = vmul.f32 %v6466, %v6852
  %v6878 = vmul.f32 %v6467, %v6852
  %v6879 = vmul.f32 %v6468, %v6852
  %v6880 = vmul.f32 %v6469, %v6852
  %v6881 = vmul.f32 %v6470, %v6852
  %v6882 = vmul.f32 %v6471, %v6852
  %v6883 = vmul.f32 %v6472, %v6852
  %v6884 = vmul.f32 %v6473, %v6852
  %v6885 = vmul.f32 %v6474, %v6852
  %v6886 = vmul.f32 %v6475, %v6852
  %v6887 = vmul.f32 %v6476, %v6852
  %v6888 = vmul.f32 %v6477, %v6852
  %v6889 = vmul.f32 %v6478, %v6852
  %v6890 = vmul.f32 %v6479, %v6852
  %v6891 = vmul.f32 %v6480, %v6852
  %v6892 = vmul.f32 %v6481, %v6852
  %v6893 = vmul.f32 %v6482, %v6852
  %v6894 = vmul.f32 %v6483, %v6852
  %v6895 = vmul.f32 %v6484, %v6852
  %v6896 = vmul.f32 %v6485, %v6852
  %v6897 = vmul.f32 %v6486, %v6852
  %v6898 = vmul.f32 %v6487, %v6852
  %v6899 = vmul.f32 %v6488, %v6852
  %v6900 = vmul.f32 %v6489, %v6852
  %v6901 = vmul.f32 %v6490, %v6852
  %v6902 = vmul.f32 %v6491, %v6852
  %v6903 = vmul.f32 %v6492, %v6852
  %v6904 = vmul.f32 %v6493, %v6852
  %v6905 = vmul.f32 %v6494, %v6852
  %v6906 = vmul.f32 %v6495, %v6852
  %v6907 = vmul.f32 %v6496, %v6852
  %v6908 = vmul.f32 %v6497, %v6852
  %v6909 = vmul.f32 %v6498, %v6852
  %v6910 = vmul.f32 %v6499, %v6852
  %v6911 = vmul.f32 %v6500, %v6852
  %v6912 = vmul.f32 %v6501, %v6852
  %v6913 = vmul.f32 %v6502, %v6852
  %v6914 = vmul.f32 %v6503, %v6852
  %v6915 = vmul.f32 %v6504, %v6852
  %v6916 = vmul.f32 %v6505, %v6852
  %v6917 = vmul.f32 %v6506, %v6852
  %v6919 = vlaneseq
  %v6920 = vshrl.u32 %v6919, 7
  %v6921 = vsub.s32 0, %v6920
  %v6922 = vrot.slane %v6847, %v6921
  %v6924 = vadd.f32 %v6854, %v6922
  %v6925 = vadd.f32 %v6855, %v6922
  %v6926 = vadd.f32 %v6856, %v6922
  %v6927 = vadd.f32 %v6857, %v6922
  %v6928 = vadd.f32 %v6858, %v6922
  %v6929 = vadd.f32 %v6859, %v6922
  %v6930 = vadd.f32 %v6860, %v6922
  %v6931 = vadd.f32 %v6861, %v6922
  %v6932 = vadd.f32 %v6862, %v6922
  %v6933 = vadd.f32 %v6863, %v6922
  %v6934 = vadd.f32 %v6864, %v6922
  %v6935 = vadd.f32 %v6865, %v6922
  %v6936 = vadd.f32 %v6866, %v6922
  %v6937 = vadd.f32 %v6867, %v6922
  %v6938 = vadd.f32 %v6868, %v6922
  %v6939 = vadd.f32 %v6869, %v6922
  %v6940 = vadd.f32 %v6870, %v6922
  %v6941 = vadd.f32 %v6871, %v6922
  %v6942 = vadd.f32 %v6872, %v6922
  %v6943 = vadd.f32 %v6873, %v6922
  %v6944 = vadd.f32 %v6874, %v6922
  %v6945 = vadd.f32 %v6875, %v6922
  %v6946 = vadd.f32 %v6876, %v6922
  %v6947 = vadd.f32 %v6877, %v6922
  %v6948 = vadd.f32 %v6878, %v6922
  %v6949 = vadd.f32 %v6879, %v6922
  %v6950 = vadd.f32 %v6880, %v6922
  %v6951 = vadd.f32 %v6881, %v6922
  %v6952 = vadd.f32 %v6882, %v6922
  %v6953 = vadd.f32 %v6883, %v6922
  %v6954 = vadd.f32 %v6884, %v6922
  %v6955 = vadd.f32 %v6885, %v6922
  %v6956 = vadd.f32 %v6886, %v6922
  %v6957 = vadd.f32 %v6887, %v6922
  %v6958 = vadd.f32 %v6888, %v6922
  %v6959 = vadd.f32 %v6889, %v6922
  %v6960 = vadd.f32 %v6890, %v6922
  %v6961 = vadd.f32 %v6891, %v6922
  %v6962 = vadd.f32 %v6892, %v6922
  %v6963 = vadd.f32 %v6893, %v6922
  %v6964 = vadd.f32 %v6894, %v6922
  %v6965 = vadd.f32 %v6895, %v6922
  %v6966 = vadd.f32 %v6896, %v6922
  %v6967 = vadd.f32 %v6897, %v6922
  %v6968 = vadd.f32 %v6898, %v6922
  %v6969 = vadd.f32 %v6899, %v6922
  %v6970 = vadd.f32 %v6900, %v6922
  %v6971 = vadd.f32 %v6901, %v6922
  %v6972 = vadd.f32 %v6902, %v6922
  %v6973 = vadd.f32 %v6903, %v6922
  %v6974 = vadd.f32 %v6904, %v6922
  %v6975 = vadd.f32 %v6905, %v6922
  %v6976 = vadd.f32 %v6906, %v6922
  %v6977 = vadd.f32 %v6907, %v6922
  %v6978 = vadd.f32 %v6908, %v6922
  %v6979 = vadd.f32 %v6909, %v6922
  %v6980 = vadd.f32 %v6910, %v6922
  %v6981 = vadd.f32 %v6911, %v6922
  %v6982 = vadd.f32 %v6912, %v6922
  %v6983 = vadd.f32 %v6913, %v6922
  %v6984 = vadd.f32 %v6914, %v6922
  %v6985 = vadd.f32 %v6915, %v6922
  %v6986 = vadd.f32 %v6916, %v6922
  %v6987 = vadd.f32 %v6917, %v6922
  %v6988 = vmax.f32 %v6924, 0.0
  %v6989 = vmax.f32 %v6925, 0.0
  %v6990 = vmax.f32 %v6926, 0.0
  %v6991 = vmax.f32 %v6927, 0.0
  %v6992 = vmax.f32 %v6928, 0.0
  %v6993 = vmax.f32 %v6929, 0.0
  %v6994 = vmax.f32 %v6930, 0.0
  %v6995 = vmax.f32 %v6931, 0.0
  %v6996 = vmax.f32 %v6932, 0.0
  %v6997 = vmax.f32 %v6933, 0.0
  %v6998 = vmax.f32 %v6934, 0.0
  %v6999 = vmax.f32 %v6935, 0.0
  %v7000 = vmax.f32 %v6936, 0.0
  %v7001 = vmax.f32 %v6937, 0.0
  %v7002 = vmax.f32 %v6938, 0.0
  %v7003 = vmax.f32 %v6939, 0.0
  %v7004 = vmax.f32 %v6940, 0.0
  %v7005 = vmax.f32 %v6941, 0.0
  %v7006 = vmax.f32 %v6942, 0.0
  %v7007 = vmax.f32 %v6943, 0.0
  %v7008 = vmax.f32 %v6944, 0.0
  %v7009 = vmax.f32 %v6945, 0.0
  %v7010 = vmax.f32 %v6946, 0.0
  %v7011 = vmax.f32 %v6947, 0.0
  %v7012 = vmax.f32 %v6948, 0.0
  %v7013 = vmax.f32 %v6949, 0.0
  %v7014 = vmax.f32 %v6950, 0.0
  %v7015 = vmax.f32 %v6951, 0.0
  %v7016 = vmax.f32 %v6952, 0.0
  %v7017 = vmax.f32 %v6953, 0.0
  %v7018 = vmax.f32 %v6954, 0.0
  %v7019 = vmax.f32 %v6955, 0.0
  %v7020 = vmax.f32 %v6956, 0.0
  %v7021 = vmax.f32 %v6957, 0.0
  %v7022 = vmax.f32 %v6958, 0.0
  %v7023 = vmax.f32 %v6959, 0.0
  %v7024 = vmax.f32 %v6960, 0.0
  %v7025 = vmax.f32 %v6961, 0.0
  %v7026 = vmax.f32 %v6962, 0.0
  %v7027 = vmax.f32 %v6963, 0.0
  %v7028 = vmax.f32 %v6964, 0.0
  %v7029 = vmax.f32 %v6965, 0.0
  %v7030 = vmax.f32 %v6966, 0.0
  %v7031 = vmax.f32 %v6967, 0.0
  %v7032 = vmax.f32 %v6968, 0.0
  %v7033 = vmax.f32 %v6969, 0.0
  %v7034 = vmax.f32 %v6970, 0.0
  %v7035 = vmax.f32 %v6971, 0.0
  %v7036 = vmax.f32 %v6972, 0.0
  %v7037 = vmax.f32 %v6973, 0.0
  %v7038 = vmax.f32 %v6974, 0.0
  %v7039 = vmax.f32 %v6975, 0.0
  %v7040 = vmax.f32 %v6976, 0.0
  %v7041 = vmax.f32 %v6977, 0.0
  %v7042 = vmax.f32 %v6978, 0.0
  %v7043 = vmax.f32 %v6979, 0.0
  %v7044 = vmax.f32 %v6980, 0.0
  %v7045 = vmax.f32 %v6981, 0.0
  %v7046 = vmax.f32 %v6982, 0.0
  %v7047 = vmax.f32 %v6983, 0.0
  %v7048 = vmax.f32 %v6984, 0.0
  %v7049 = vmax.f32 %v6985, 0.0
  %v7050 = vmax.f32 %v6986, 0.0
  %v7051 = vmax.f32 %v6987, 0.0
  %7052 = vst.msk [vmem:[%s196 + $0x1] sm:$0xff] %vm44, %v6988
  %7053 = vst.msk [vmem:[%s196 + $0x9] sm:$0xff] %vm44, %v6989
  %7054 = vst.msk [vmem:[%s196 + $0x19] sm:$0xff] %vm44, %v6990
  %7055 = vst.msk [vmem:[%s196 + $0x21] sm:$0xff] %vm44, %v6991
  %7056 = vst.msk [vmem:[%s196 + $0x31] sm:$0xff] %vm44, %v6992
  %7057 = vst.msk [vmem:[%s196 + $0x39] sm:$0xff] %vm44, %v6993
  %7058 = vst.msk [vmem:[%s196 + $0x49] sm:$0xff] %vm44, %v6994
  %7059 = vst.msk [vmem:[%s196 + $0x51] sm:$0xff] %vm44, %v6995
  %7060 = vst.msk [vmem:[%s196 + $0x61] sm:$0xff] %vm44, %v6996
  %7061 = vst.msk [vmem:[%s196 + $0x69] sm:$0xff] %vm44, %v6997
  %7062 = vst.msk [vmem:[%s196 + $0x79] sm:$0xff] %vm44, %v6998
  %7063 = vst.msk [vmem:[%s196 + $0x81] sm:$0xff] %vm44, %v6999
  %7064 = vst.msk [vmem:[%s196 + $0x91] sm:$0xff] %vm44, %v7000
  %7065 = vst.msk [vmem:[%s196 + $0x99] sm:$0xff] %vm44, %v7001
  %7066 = vst.msk [vmem:[%s196 + $0xa9] sm:$0xff] %vm44, %v7002
  %7067 = vst.msk [vmem:[%s196 + $0xb1] sm:$0xff] %vm44, %v7003
  %7068 = vst.msk [vmem:[%s196 + $0xc1] sm:$0xff] %vm44, %v7004
  %7069 = vst.msk [vmem:[%s196 + $0xc9] sm:$0xff] %vm44, %v7005
  %7070 = vst.msk [vmem:[%s196 + $0xd9] sm:$0xff] %vm44, %v7006
  %7071 = vst.msk [vmem:[%s196 + $0xe1] sm:$0xff] %vm44, %v7007
  %7072 = vst.msk [vmem:[%s196 + $0xf1] sm:$0xff] %vm44, %v7008
  %7073 = vst.msk [vmem:[%s196 + $0xf9] sm:$0xff] %vm44, %v7009
  %7074 = vst.msk [vmem:[%s196 + $0x109] sm:$0xff] %vm44, %v7010
  %7075 = vst.msk [vmem:[%s196 + $0x111] sm:$0xff] %vm44, %v7011
  %7076 = vst.msk [vmem:[%s196 + $0x121] sm:$0xff] %vm44, %v7012
  %7077 = vst.msk [vmem:[%s196 + $0x129] sm:$0xff] %vm44, %v7013
  %7078 = vst.msk [vmem:[%s196 + $0x139] sm:$0xff] %vm44, %v7014
  %7079 = vst.msk [vmem:[%s196 + $0x141] sm:$0xff] %vm44, %v7015
  %7080 = vst.msk [vmem:[%s196 + $0x151] sm:$0xff] %vm44, %v7016
  %7081 = vst.msk [vmem:[%s196 + $0x159] sm:$0xff] %vm44, %v7017
  %7082 = vst.msk [vmem:[%s196 + $0x169] sm:$0xff] %vm44, %v7018
  %7083 = vst.msk [vmem:[%s196 + $0x171] sm:$0xff] %vm44, %v7019
  %7084 = vst.msk [vmem:[%s196 + $0x1b1] sm:$0xff] %vm44, %v7020
  %7085 = vst.msk [vmem:[%s196 + $0x1b9] sm:$0xff] %vm44, %v7021
  %7086 = vst.msk [vmem:[%s196 + $0x1c9] sm:$0xff] %vm44, %v7022
  %7087 = vst.msk [vmem:[%s196 + $0x1d1] sm:$0xff] %vm44, %v7023
  %7088 = vst.msk [vmem:[%s196 + $0x1e1] sm:$0xff] %vm44, %v7024
  %7089 = vst.msk [vmem:[%s196 + $0x1e9] sm:$0xff] %vm44, %v7025
  %7090 = vst.msk [vmem:[%s196 + $0x1f9] sm:$0xff] %vm44, %v7026
  %7091 = vst.msk [vmem:[%s196 + $0x201] sm:$0xff] %vm44, %v7027
  %7092 = vst.msk [vmem:[%s196 + $0x211] sm:$0xff] %vm44, %v7028
  %7093 = vst.msk [vmem:[%s196 + $0x219] sm:$0xff] %vm44, %v7029
  %7094 = vst.msk [vmem:[%s196 + $0x229] sm:$0xff] %vm44, %v7030
  %7095 = vst.msk [vmem:[%s196 + $0x231] sm:$0xff] %vm44, %v7031
  %7096 = vst.msk [vmem:[%s196 + $0x241] sm:$0xff] %vm44, %v7032
  %7097 = vst.msk [vmem:[%s196 + $0x249] sm:$0xff] %vm44, %v7033
  %7098 = vst.msk [vmem:[%s196 + $0x259] sm:$0xff] %vm44, %v7034
  %7099 = vst.msk [vmem:[%s196 + $0x261] sm:$0xff] %vm44, %v7035
  %7100 = vst.msk [vmem:[%s196 + $0x271] sm:$0xff] %vm44, %v7036
  %7101 = vst.msk [vmem:[%s196 + $0x279] sm:$0xff] %vm44, %v7037
  %7102 = vst.msk [vmem:[%s196 + $0x289] sm:$0xff] %vm44, %v7038
  %7103 = vst.msk [vmem:[%s196 + $0x291] sm:$0xff] %vm44, %v7039
  %7104 = vst.msk [vmem:[%s196 + $0x2a1] sm:$0xff] %vm44, %v7040
  %7105 = vst.msk [vmem:[%s196 + $0x2a9] sm:$0xff] %vm44, %v7041
  %7106 = vst.msk [vmem:[%s196 + $0x2b9] sm:$0xff] %vm44, %v7042
  %7107 = vst.msk [vmem:[%s196 + $0x2c1] sm:$0xff] %vm44, %v7043
  %7108 = vst.msk [vmem:[%s196 + $0x2d1] sm:$0xff] %vm44, %v7044
  %7109 = vst.msk [vmem:[%s196 + $0x2d9] sm:$0xff] %vm44, %v7045
  %7110 = vst.msk [vmem:[%s196 + $0x2e9] sm:$0xff] %vm44, %v7046
  %7111 = vst.msk [vmem:[%s196 + $0x2f1] sm:$0xff] %vm44, %v7047
  %7112 = vst.msk [vmem:[%s196 + $0x301] sm:$0xff] %vm44, %v7048
  %7113 = vst.msk [vmem:[%s196 + $0x309] sm:$0xff] %vm44, %v7049
  %7114 = vst.msk [vmem:[%s196 + $0x319] sm:$0xff] %vm44, %v7050
  %7115 = vst.msk [vmem:[%s196 + $0x321] sm:$0xff] %vm44, %v7051
  %v7116 = vld [vmem:[#allocation2] sm:$0xff]
  %v7117 = vld [vmem:[#allocation2 + $0x8] sm:$0xff]
  %v7118 = vld [vmem:[#allocation2 + $0x18] sm:$0xff]
  %v7119 = vld [vmem:[#allocation2 + $0x20] sm:$0xff]
  %v7120 = vld [vmem:[#allocation2 + $0x30] sm:$0xff]
  %v7121 = vld [vmem:[#allocation2 + $0x38] sm:$0xff]
  %v7122 = vld [vmem:[#allocation2 + $0x48] sm:$0xff]
  %v7123 = vld [vmem:[#allocation2 + $0x50] sm:$0xff]
  %v7124 = vld [vmem:[#allocation2 + $0x60] sm:$0xff]
  %v7125 = vld [vmem:[#allocation2 + $0x68] sm:$0xff]
  %v7126 = vld [vmem:[#allocation2 + $0x78] sm:$0xff]
  %v7127 = vld [vmem:[#allocation2 + $0x80] sm:$0xff]
  %v7128 = vld [vmem:[#allocation2 + $0x90] sm:$0xff]
  %v7129 = vld [vmem:[#allocation2 + $0x98] sm:$0xff]
  %v7130 = vld [vmem:[#allocation2 + $0xa8] sm:$0xff]
  %v7131 = vld [vmem:[#allocation2 + $0xb0] sm:$0xff]
  %v7132 = vld [vmem:[#allocation2 + $0xc0] sm:$0xff]
  %v7133 = vld [vmem:[#allocation2 + $0xc8] sm:$0xff]
  %v7134 = vld [vmem:[#allocation2 + $0xd8] sm:$0xff]
  %v7135 = vld [vmem:[#allocation2 + $0xe0] sm:$0xff]
  %v7136 = vld [vmem:[#allocation2 + $0xf0] sm:$0xff]
  %v7137 = vld [vmem:[#allocation2 + $0xf8] sm:$0xff]
  %v7138 = vld [vmem:[#allocation2 + $0x108] sm:$0xff]
  %v7139 = vld [vmem:[#allocation2 + $0x110] sm:$0xff]
  %v7140 = vld [vmem:[#allocation2 + $0x120] sm:$0xff]
  %v7141 = vld [vmem:[#allocation2 + $0x128] sm:$0xff]
  %v7142 = vld [vmem:[#allocation2 + $0x138] sm:$0xff]
  %v7143 = vld [vmem:[#allocation2 + $0x140] sm:$0xff]
  %v7144 = vld [vmem:[#allocation2 + $0x150] sm:$0xff]
  %v7145 = vld [vmem:[#allocation2 + $0x158] sm:$0xff]
  %v7146 = vld [vmem:[#allocation2 + $0x168] sm:$0xff]
  %v7147 = vld [vmem:[#allocation2 + $0x170] sm:$0xff]
  %v7148 = vld [vmem:[#allocation2 + $0x1b0] sm:$0xff]
  %v7149 = vld [vmem:[#allocation2 + $0x1b8] sm:$0xff]
  %v7150 = vld [vmem:[#allocation2 + $0x1c8] sm:$0xff]
  %v7151 = vld [vmem:[#allocation2 + $0x1d0] sm:$0xff]
  %v7152 = vld [vmem:[#allocation2 + $0x1e0] sm:$0xff]
  %v7153 = vld [vmem:[#allocation2 + $0x1e8] sm:$0xff]
  %v7154 = vld [vmem:[#allocation2 + $0x1f8] sm:$0xff]
  %v7155 = vld [vmem:[#allocation2 + $0x200] sm:$0xff]
  %v7156 = vld [vmem:[#allocation2 + $0x210] sm:$0xff]
  %v7157 = vld [vmem:[#allocation2 + $0x218] sm:$0xff]
  %v7158 = vld [vmem:[#allocation2 + $0x228] sm:$0xff]
  %v7159 = vld [vmem:[#allocation2 + $0x230] sm:$0xff]
  %v7160 = vld [vmem:[#allocation2 + $0x240] sm:$0xff]
  %v7161 = vld [vmem:[#allocation2 + $0x248] sm:$0xff]
  %v7162 = vld [vmem:[#allocation2 + $0x258] sm:$0xff]
  %v7163 = vld [vmem:[#allocation2 + $0x260] sm:$0xff]
  %v7164 = vld [vmem:[#allocation2 + $0x270] sm:$0xff]
  %v7165 = vld [vmem:[#allocation2 + $0x278] sm:$0xff]
  %v7166 = vld [vmem:[#allocation2 + $0x288] sm:$0xff]
  %v7167 = vld [vmem:[#allocation2 + $0x290] sm:$0xff]
  %v7168 = vld [vmem:[#allocation2 + $0x2a0] sm:$0xff]
  %v7169 = vld [vmem:[#allocation2 + $0x2a8] sm:$0xff]
  %v7170 = vld [vmem:[#allocation2 + $0x2b8] sm:$0xff]
  %v7171 = vld [vmem:[#allocation2 + $0x2c0] sm:$0xff]
  %v7172 = vld [vmem:[#allocation2 + $0x2d0] sm:$0xff]
  %v7173 = vld [vmem:[#allocation2 + $0x2d8] sm:$0xff]
  %v7174 = vld [vmem:[#allocation2 + $0x2e8] sm:$0xff]
  %v7175 = vld [vmem:[#allocation2 + $0x2f0] sm:$0xff]
  %v7176 = vld [vmem:[#allocation2 + $0x300] sm:$0xff]
  %v7177 = vld [vmem:[#allocation2 + $0x308] sm:$0xff]
  %v7178 = vld [vmem:[#allocation2 + $0x318] sm:$0xff]
  %v7179 = vld [vmem:[#allocation2 + $0x320] sm:$0xff]
  %v7180 = vld [vmem:[#allocation2 + $0x1] sm:$0xff]
  %v7181 = vld [vmem:[#allocation2 + $0x9] sm:$0xff]
  %v7182 = vld [vmem:[#allocation2 + $0x19] sm:$0xff]
  %v7183 = vld [vmem:[#allocation2 + $0x21] sm:$0xff]
  %v7184 = vld [vmem:[#allocation2 + $0x31] sm:$0xff]
  %v7185 = vld [vmem:[#allocation2 + $0x39] sm:$0xff]
  %v7186 = vld [vmem:[#allocation2 + $0x49] sm:$0xff]
  %v7187 = vld [vmem:[#allocation2 + $0x51] sm:$0xff]
  %v7188 = vld [vmem:[#allocation2 + $0x61] sm:$0xff]
  %v7189 = vld [vmem:[#allocation2 + $0x69] sm:$0xff]
  %v7190 = vld [vmem:[#allocation2 + $0x79] sm:$0xff]
  %v7191 = vld [vmem:[#allocation2 + $0x81] sm:$0xff]
  %v7192 = vld [vmem:[#allocation2 + $0x91] sm:$0xff]
  %v7193 = vld [vmem:[#allocation2 + $0x99] sm:$0xff]
  %v7194 = vld [vmem:[#allocation2 + $0xa9] sm:$0xff]
  %v7195 = vld [vmem:[#allocation2 + $0xb1] sm:$0xff]
  %v7196 = vld [vmem:[#allocation2 + $0xc1] sm:$0xff]
  %v7197 = vld [vmem:[#allocation2 + $0xc9] sm:$0xff]
  %v7198 = vld [vmem:[#allocation2 + $0xd9] sm:$0xff]
  %v7199 = vld [vmem:[#allocation2 + $0xe1] sm:$0xff]
  %v7200 = vld [vmem:[#allocation2 + $0xf1] sm:$0xff]
  %v7201 = vld [vmem:[#allocation2 + $0xf9] sm:$0xff]
  %v7202 = vld [vmem:[#allocation2 + $0x109] sm:$0xff]
  %v7203 = vld [vmem:[#allocation2 + $0x111] sm:$0xff]
  %v7204 = vld [vmem:[#allocation2 + $0x121] sm:$0xff]
  %v7205 = vld [vmem:[#allocation2 + $0x129] sm:$0xff]
  %v7206 = vld [vmem:[#allocation2 + $0x139] sm:$0xff]
  %v7207 = vld [vmem:[#allocation2 + $0x141] sm:$0xff]
  %v7208 = vld [vmem:[#allocation2 + $0x151] sm:$0xff]
  %v7209 = vld [vmem:[#allocation2 + $0x159] sm:$0xff]
  %v7210 = vld [vmem:[#allocation2 + $0x169] sm:$0xff]
  %v7211 = vld [vmem:[#allocation2 + $0x171] sm:$0xff]
  %v7212 = vld [vmem:[#allocation2 + $0x1b1] sm:$0xff]
  %v7213 = vld [vmem:[#allocation2 + $0x1b9] sm:$0xff]
  %v7214 = vld [vmem:[#allocation2 + $0x1c9] sm:$0xff]
  %v7215 = vld [vmem:[#allocation2 + $0x1d1] sm:$0xff]
  %v7216 = vld [vmem:[#allocation2 + $0x1e1] sm:$0xff]
  %v7217 = vld [vmem:[#allocation2 + $0x1e9] sm:$0xff]
  %v7218 = vld [vmem:[#allocation2 + $0x1f9] sm:$0xff]
  %v7219 = vld [vmem:[#allocation2 + $0x201] sm:$0xff]
  %v7220 = vld [vmem:[#allocation2 + $0x211] sm:$0xff]
  %v7221 = vld [vmem:[#allocation2 + $0x219] sm:$0xff]
  %v7222 = vld [vmem:[#allocation2 + $0x229] sm:$0xff]
  %v7223 = vld [vmem:[#allocation2 + $0x231] sm:$0xff]
  %v7224 = vld [vmem:[#allocation2 + $0x241] sm:$0xff]
  %v7225 = vld [vmem:[#allocation2 + $0x249] sm:$0xff]
  %v7226 = vld [vmem:[#allocation2 + $0x259] sm:$0xff]
  %v7227 = vld [vmem:[#allocation2 + $0x261] sm:$0xff]
  %v7228 = vld [vmem:[#allocation2 + $0x271] sm:$0xff]
  %v7229 = vld [vmem:[#allocation2 + $0x279] sm:$0xff]
  %v7230 = vld [vmem:[#allocation2 + $0x289] sm:$0xff]
  %v7231 = vld [vmem:[#allocation2 + $0x291] sm:$0xff]
  %v7232 = vld [vmem:[#allocation2 + $0x2a1] sm:$0xff]
  %v7233 = vld [vmem:[#allocation2 + $0x2a9] sm:$0xff]
  %v7234 = vld [vmem:[#allocation2 + $0x2b9] sm:$0xff]
  %v7235 = vld [vmem:[#allocation2 + $0x2c1] sm:$0xff]
  %v7236 = vld [vmem:[#allocation2 + $0x2d1] sm:$0xff]
  %v7237 = vld [vmem:[#allocation2 + $0x2d9] sm:$0xff]
  %v7238 = vld [vmem:[#allocation2 + $0x2e9] sm:$0xff]
  %v7239 = vld [vmem:[#allocation2 + $0x2f1] sm:$0xff]
  %v7240 = vld [vmem:[#allocation2 + $0x301] sm:$0xff]
  %v7241 = vld [vmem:[#allocation2 + $0x309] sm:$0xff]
  %v7242 = vld [vmem:[#allocation2 + $0x319] sm:$0xff]
  %v7243 = vld [vmem:[#allocation2 + $0x321] sm:$0xff]
  %v7245 = vsel %vm44, %v7180, 0
  %v7248 = vsel %vm44, %v7181, 0
  %v7251 = vsel %vm44, %v7182, 0
  %v7254 = vsel %vm44, %v7183, 0
  %v7257 = vsel %vm44, %v7184, 0
  %v7260 = vsel %vm44, %v7185, 0
  %v7263 = vsel %vm44, %v7186, 0
  %v7266 = vsel %vm44, %v7187, 0
  %v7269 = vsel %vm44, %v7188, 0
  %v7272 = vsel %vm44, %v7189, 0
  %v7275 = vsel %vm44, %v7190, 0
  %v7278 = vsel %vm44, %v7191, 0
  %v7281 = vsel %vm44, %v7192, 0
  %v7284 = vsel %vm44, %v7193, 0
  %v7287 = vsel %vm44, %v7194, 0
  %v7290 = vsel %vm44, %v7195, 0
  %v7293 = vsel %vm44, %v7196, 0
  %v7296 = vsel %vm44, %v7197, 0
  %v7299 = vsel %vm44, %v7198, 0
  %v7302 = vsel %vm44, %v7199, 0
  %v7305 = vsel %vm44, %v7200, 0
  %v7308 = vsel %vm44, %v7201, 0
  %v7311 = vsel %vm44, %v7202, 0
  %v7314 = vsel %vm44, %v7203, 0
  %v7317 = vsel %vm44, %v7204, 0
  %v7320 = vsel %vm44, %v7205, 0
  %v7323 = vsel %vm44, %v7206, 0
  %v7326 = vsel %vm44, %v7207, 0
  %v7329 = vsel %vm44, %v7208, 0
  %v7332 = vsel %vm44, %v7209, 0
  %v7335 = vsel %vm44, %v7210, 0
  %v7338 = vsel %vm44, %v7211, 0
  %v7341 = vsel %vm44, %v7212, 0
  %v7344 = vsel %vm44, %v7213, 0
  %v7347 = vsel %vm44, %v7214, 0
  %v7350 = vsel %vm44, %v7215, 0
  %v7353 = vsel %vm44, %v7216, 0
  %v7356 = vsel %vm44, %v7217, 0
  %v7359 = vsel %vm44, %v7218, 0
  %v7362 = vsel %vm44, %v7219, 0
  %v7365 = vsel %vm44, %v7220, 0
  %v7368 = vsel %vm44, %v7221, 0
  %v7371 = vsel %vm44, %v7222, 0
  %v7374 = vsel %vm44, %v7223, 0
  %v7377 = vsel %vm44, %v7224, 0
  %v7380 = vsel %vm44, %v7225, 0
  %v7383 = vsel %vm44, %v7226, 0
  %v7386 = vsel %vm44, %v7227, 0
  %v7389 = vsel %vm44, %v7228, 0
  %v7392 = vsel %vm44, %v7229, 0
  %v7395 = vsel %vm44, %v7230, 0
  %v7398 = vsel %vm44, %v7231, 0
  %v7401 = vsel %vm44, %v7232, 0
  %v7404 = vsel %vm44, %v7233, 0
  %v7407 = vsel %vm44, %v7234, 0
  %v7410 = vsel %vm44, %v7235, 0
  %v7413 = vsel %vm44, %v7236, 0
  %v7416 = vsel %vm44, %v7237, 0
  %v7419 = vsel %vm44, %v7238, 0
  %v7422 = vsel %vm44, %v7239, 0
  %v7425 = vsel %vm44, %v7240, 0
  %v7428 = vsel %vm44, %v7241, 0
  %v7431 = vsel %vm44, %v7242, 0
  %v7434 = vsel %vm44, %v7243, 0
  %v7437 = vsel %vm581, %v36, 0
  %7439 = vmatprep.subr.mxu0 0.0
  %7440 = vmatpush1.msra.mxu0 %v7437
  %7441 = vmatprep.subr.mxu0 0.0
  %7442 = vmatpush1.msra.mxu0 0.0
  %7443 = vmatprep.subr.mxu0 0.0
  %7444 = vmatpush1.msra.mxu0 0.0
  %7445 = vmatprep.subr.mxu0 0.0
  %7446 = vmatpush1.msra.mxu0 0.0
  %7447 = vmatprep.subr.mxu0 0.0
  %7448 = vmatpush1.msra.mxu0 0.0
  %7449 = vmatprep.subr.mxu0 0.0
  %7450 = vmatpush1.msra.mxu0 0.0
  %7451 = vmatprep.subr.mxu0 0.0
  %7452 = vmatpush1.msra.mxu0 0.0
  %7453 = vmatprep.subr.mxu0 0.0
  %7454 = vmatpush1.msra.mxu0 0.0
  %7455 = vmatprep.subr.mxu0 0.0
  %7456 = vmatpush1.msra.mxu0 0.0
  %7457 = vmatprep.subr.mxu0 0.0
  %7458 = vmatpush1.msra.mxu0 0.0
  %7459 = vmatprep.subr.mxu0 0.0
  %7460 = vmatpush1.msra.mxu0 0.0
  %7461 = vmatprep.subr.mxu0 0.0
  %7462 = vmatpush1.msra.mxu0 0.0
  %7463 = vmatprep.subr.mxu0 0.0
  %7464 = vmatpush1.msra.mxu0 0.0
  %7465 = vmatprep.subr.mxu0 0.0
  %7466 = vmatpush1.msra.mxu0 0.0
  %7467 = vmatprep.subr.mxu0 0.0
  %7468 = vmatpush1.msra.mxu0 0.0
  %7469 = vmatprep.subr.mxu0 0.0
  %7470 = vmatpush1.msra.mxu0 0.0
  %7471 = vmatprep.subr.mxu0 0.0
  %7472 = vmatpush1.msra.mxu0 0.0
  %7473 = vmatprep.subr.mxu0 0.0
  %7474 = vmatpush1.msra.mxu0 0.0
  %7475 = vmatprep.subr.mxu0 0.0
  %7476 = vmatpush1.msra.mxu0 0.0
  %7477 = vmatprep.subr.mxu0 0.0
  %7478 = vmatpush1.msra.mxu0 0.0
  %7479 = vmatprep.subr.mxu0 0.0
  %7480 = vmatpush1.msra.mxu0 0.0
  %7481 = vmatprep.subr.mxu0 0.0
  %7482 = vmatpush1.msra.mxu0 0.0
  %7483 = vmatprep.subr.mxu0 0.0
  %7484 = vmatpush1.msra.mxu0 0.0
  %7485 = vmatprep.subr.mxu0 0.0
  %7486 = vmatpush1.msra.mxu0 0.0
  %7487 = vmatprep.subr.mxu0 0.0
  %7488 = vmatpush1.msra.mxu0 0.0
  %7489 = vmatprep.subr.mxu0 0.0
  %7490 = vmatpush1.msra.mxu0 0.0
  %7491 = vmatprep.subr.mxu0 0.0
  %7492 = vmatpush1.msra.mxu0 0.0
  %7493 = vmatprep.subr.mxu0 0.0
  %7494 = vmatpush1.msra.mxu0 0.0
  %7495 = vmatprep.subr.mxu0 0.0
  %7496 = vmatpush1.msra.mxu0 0.0
  %7497 = vmatprep.subr.mxu0 0.0
  %7498 = vmatpush1.msra.mxu0 0.0
  %7499 = vmatprep.subr.mxu0 0.0
  %7500 = vmatpush1.msra.mxu0 0.0
  %7501 = vmatprep.subr.mxu0 0.0
  %7502 = vmatpush1.msra.mxu0 0.0
  %7503 = vmatprep.mubr.f32.mxu0 0.0
  %7504 = vmatmul.mubr.f32.gmra.mrb[0].mxu0 %v7245
  %v7505 = vpop.f32.mrb[0].mxu0
  %v7506 = vadd.f32 0.0, %v7505
  %v7507 = vpop.f32.mrb[0].mxu0
  %7508 = vmatprep.mubr.f32.mxu0 0.0
  %7509 = vmatmul.mubr.f32.gmra.mrb[0].mxu0 %v7248
  %v7510 = vpop.f32.mrb[0].mxu0
  %v7511 = vadd.f32 0.0, %v7510
  %v7512 = vpop.f32.mrb[0].mxu0
  %7513 = vmatprep.mubr.f32.mxu0 0.0
  %7514 = vmatmul.mubr.f32.gmra.mrb[0].mxu0 %v7251
  %v7515 = vpop.f32.mrb[0].mxu0
  %v7516 = vadd.f32 0.0, %v7515
  %v7517 = vpop.f32.mrb[0].mxu0
  %7518 = vmatprep.mubr.f32.mxu0 0.0
  %7519 = vmatmul.mubr.f32.gmra.mrb[0].mxu0 %v7254
  %v7520 = vpop.f32.mrb[0].mxu0
  %v7521 = vadd.f32 0.0, %v7520
  %v7522 = vpop.f32.mrb[0].mxu0
  %7523 = vmatprep.mubr.f32.mxu0 0.0
  %7524 = vmatmul.mubr.f32.gmra.mrb[0].mxu0 %v7257
  %v7525 = vpop.f32.mrb[0].mxu0
  %v7526 = vadd.f32 0.0, %v7525
  %v7527 = vpop.f32.mrb[0].mxu0
  %7528 = vmatprep.mubr.f32.mxu0 0.0
  %7529 = vmatmul.mubr.f32.gmra.mrb[0].mxu0 %v7260
  %v7530 = vpop.f32.mrb[0].mxu0
  %v7531 = vadd.f32 0.0, %v7530
  %v7532 = vpop.f32.mrb[0].mxu0
  %7533 = vmatprep.mubr.f32.mxu0 0.0
  %7534 = vmatmul.mubr.f32.gmra.mrb[0].mxu0 %v7263
  %v7535 = vpop.f32.mrb[0].mxu0
  %v7536 = vadd.f32 0.0, %v7535
  %v7537 = vpop.f32.mrb[0].mxu0
  %7538 = vmatprep.mubr.f32.mxu0 0.0
  %7539 = vmatmul.mubr.f32.gmra.mrb[0].mxu0 %v7266
  %v7540 = vpop.f32.mrb[0].mxu0
  %v7541 = vadd.f32 0.0, %v7540
  %v7542 = vpop.f32.mrb[0].mxu0
  %7543 = vmatprep.mubr.f32.mxu0 0.0
  %7544 = vmatmul.mubr.f32.gmra.mrb[0].mxu0 %v7269
  %v7545 = vpop.f32.mrb[0].mxu0
  %v7546 = vadd.f32 0.0, %v7545
  %v7547 = vpop.f32.mrb[0].mxu0
  %7548 = vmatprep.mubr.f32.mxu0 0.0
  %7549 = vmatmul.mubr.f32.gmra.mrb[0].mxu0 %v7272
  %v7550 = vpop.f32.mrb[0].mxu0
  %v7551 = vadd.f32 0.0, %v7550
  %v7552 = vpop.f32.mrb[0].mxu0
  %7553 = vmatprep.mubr.f32.mxu0 0.0
  %7554 = vmatmul.mubr.f32.gmra.mrb[0].mxu0 %v7275
  %v7555 = vpop.f32.mrb[0].mxu0
  %v7556 = vadd.f32 0.0, %v7555
  %v7557 = vpop.f32.mrb[0].mxu0
  %7558 = vmatprep.mubr.f32.mxu0 0.0
  %7559 = vmatmul.mubr.f32.gmra.mrb[0].mxu0 %v7278
  %v7560 = vpop.f32.mrb[0].mxu0
  %v7561 = vadd.f32 0.0, %v7560
  %v7562 = vpop.f32.mrb[0].mxu0
  %7563 = vmatprep.mubr.f32.mxu0 0.0
  %7564 = vmatmul.mubr.f32.gmra.mrb[0].mxu0 %v7281
  %v7565 = vpop.f32.mrb[0].mxu0
  %v7566 = vadd.f32 0.0, %v7565
  %v7567 = vpop.f32.mrb[0].mxu0
  %7568 = vmatprep.mubr.f32.mxu0 0.0
  %7569 = vmatmul.mubr.f32.gmra.mrb[0].mxu0 %v7284
  %v7570 = vpop.f32.mrb[0].mxu0
  %v7571 = vadd.f32 0.0, %v7570
  %v7572 = vpop.f32.mrb[0].mxu0
  %7573 = vmatprep.mubr.f32.mxu0 0.0
  %7574 = vmatmul.mubr.f32.gmra.mrb[0].mxu0 %v7287
  %v7575 = vpop.f32.mrb[0].mxu0
  %v7576 = vadd.f32 0.0, %v7575
  %v7577 = vpop.f32.mrb[0].mxu0
  %7578 = vmatprep.mubr.f32.mxu0 0.0
  %7579 = vmatmul.mubr.f32.gmra.mrb[0].mxu0 %v7290
  %v7580 = vpop.f32.mrb[0].mxu0
  %v7581 = vadd.f32 0.0, %v7580
  %v7582 = vpop.f32.mrb[0].mxu0
  %7583 = vmatprep.mubr.f32.mxu0 0.0
  %7584 = vmatmul.mubr.f32.gmra.mrb[0].mxu0 %v7293
  %v7585 = vpop.f32.mrb[0].mxu0
  %v7586 = vadd.f32 0.0, %v7585
  %v7587 = vpop.f32.mrb[0].mxu0
  %7588 = vmatprep.mubr.f32.mxu0 0.0
  %7589 = vmatmul.mubr.f32.gmra.mrb[0].mxu0 %v7296
  %v7590 = vpop.f32.mrb[0].mxu0
  %v7591 = vadd.f32 0.0, %v7590
  %v7592 = vpop.f32.mrb[0].mxu0
  %7593 = vmatprep.mubr.f32.mxu0 0.0
  %7594 = vmatmul.mubr.f32.gmra.mrb[0].mxu0 %v7299
  %v7595 = vpop.f32.mrb[0].mxu0
  %v7596 = vadd.f32 0.0, %v7595
  %v7597 = vpop.f32.mrb[0].mxu0
  %7598 = vmatprep.mubr.f32.mxu0 0.0
  %7599 = vmatmul.mubr.f32.gmra.mrb[0].mxu0 %v7302
  %v7600 = vpop.f32.mrb[0].mxu0
  %v7601 = vadd.f32 0.0, %v7600
  %v7602 = vpop.f32.mrb[0].mxu0
  %7603 = vmatprep.mubr.f32.mxu0 0.0
  %7604 = vmatmul.mubr.f32.gmra.mrb[0].mxu0 %v7305
  %v7605 = vpop.f32.mrb[0].mxu0
  %v7606 = vadd.f32 0.0, %v7605
  %v7607 = vpop.f32.mrb[0].mxu0
  %7608 = vmatprep.mubr.f32.mxu0 0.0
  %7609 = vmatmul.mubr.f32.gmra.mrb[0].mxu0 %v7308
  %v7610 = vpop.f32.mrb[0].mxu0
  %v7611 = vadd.f32 0.0, %v7610
  %v7612 = vpop.f32.mrb[0].mxu0
  %7613 = vmatprep.mubr.f32.mxu0 0.0
  %7614 = vmatmul.mubr.f32.gmra.mrb[0].mxu0 %v7311
  %v7615 = vpop.f32.mrb[0].mxu0
  %v7616 = vadd.f32 0.0, %v7615
  %v7617 = vpop.f32.mrb[0].mxu0
  %7618 = vmatprep.mubr.f32.mxu0 0.0
  %7619 = vmatmul.mubr.f32.gmra.mrb[0].mxu0 %v7314
  %v7620 = vpop.f32.mrb[0].mxu0
  %v7621 = vadd.f32 0.0, %v7620
  %v7622 = vpop.f32.mrb[0].mxu0
  %7623 = vmatprep.mubr.f32.mxu0 0.0
  %7624 = vmatmul.mubr.f32.gmra.mrb[0].mxu0 %v7317
  %v7625 = vpop.f32.mrb[0].mxu0
  %v7626 = vadd.f32 0.0, %v7625
  %v7627 = vpop.f32.mrb[0].mxu0
  %7628 = vmatprep.mubr.f32.mxu0 0.0
  %7629 = vmatmul.mubr.f32.gmra.mrb[0].mxu0 %v7320
  %v7630 = vpop.f32.mrb[0].mxu0
  %v7631 = vadd.f32 0.0, %v7630
  %v7632 = vpop.f32.mrb[0].mxu0
  %7633 = vmatprep.mubr.f32.mxu0 0.0
  %7634 = vmatmul.mubr.f32.gmra.mrb[0].mxu0 %v7323
  %v7635 = vpop.f32.mrb[0].mxu0
  %v7636 = vadd.f32 0.0, %v7635
  %v7637 = vpop.f32.mrb[0].mxu0
  %7638 = vmatprep.mubr.f32.mxu0 0.0
  %7639 = vmatmul.mubr.f32.gmra.mrb[0].mxu0 %v7326
  %v7640 = vpop.f32.mrb[0].mxu0
  %v7641 = vadd.f32 0.0, %v7640
  %v7642 = vpop.f32.mrb[0].mxu0
  %7643 = vmatprep.mubr.f32.mxu0 0.0
  %7644 = vmatmul.mubr.f32.gmra.mrb[0].mxu0 %v7329
  %v7645 = vpop.f32.mrb[0].mxu0
  %v7646 = vadd.f32 0.0, %v7645
  %v7647 = vpop.f32.mrb[0].mxu0
  %7648 = vmatprep.mubr.f32.mxu0 0.0
  %7649 = vmatmul.mubr.f32.gmra.mrb[0].mxu0 %v7332
  %v7650 = vpop.f32.mrb[0].mxu0
  %v7651 = vadd.f32 0.0, %v7650
  %v7652 = vpop.f32.mrb[0].mxu0
  %7653 = vmatprep.mubr.f32.mxu0 0.0
  %7654 = vmatmul.mubr.f32.gmra.mrb[0].mxu0 %v7335
  %v7655 = vpop.f32.mrb[0].mxu0
  %v7656 = vadd.f32 0.0, %v7655
  %v7657 = vpop.f32.mrb[0].mxu0
  %7658 = vmatprep.mubr.f32.mxu0 0.0
  %7659 = vmatmul.mubr.f32.gmra.mrb[0].mxu0 %v7338
  %v7660 = vpop.f32.mrb[0].mxu0
  %v7661 = vadd.f32 0.0, %v7660
  %v7662 = vpop.f32.mrb[0].mxu0
  %7663 = vmatprep.mubr.f32.mxu0 0.0
  %7664 = vmatmul.mubr.f32.gmra.mrb[0].mxu0 %v7341
  %v7665 = vpop.f32.mrb[0].mxu0
  %v7666 = vadd.f32 0.0, %v7665
  %v7667 = vpop.f32.mrb[0].mxu0
  %7668 = vmatprep.mubr.f32.mxu0 0.0
  %7669 = vmatmul.mubr.f32.gmra.mrb[0].mxu0 %v7344
  %v7670 = vpop.f32.mrb[0].mxu0
  %v7671 = vadd.f32 0.0, %v7670
  %v7672 = vpop.f32.mrb[0].mxu0
  %7673 = vmatprep.mubr.f32.mxu0 0.0
  %7674 = vmatmul.mubr.f32.gmra.mrb[0].mxu0 %v7347
  %v7675 = vpop.f32.mrb[0].mxu0
  %v7676 = vadd.f32 0.0, %v7675
  %v7677 = vpop.f32.mrb[0].mxu0
  %7678 = vmatprep.mubr.f32.mxu0 0.0
  %7679 = vmatmul.mubr.f32.gmra.mrb[0].mxu0 %v7350
  %v7680 = vpop.f32.mrb[0].mxu0
  %v7681 = vadd.f32 0.0, %v7680
  %v7682 = vpop.f32.mrb[0].mxu0
  %7683 = vmatprep.mubr.f32.mxu0 0.0
  %7684 = vmatmul.mubr.f32.gmra.mrb[0].mxu0 %v7353
  %v7685 = vpop.f32.mrb[0].mxu0
  %v7686 = vadd.f32 0.0, %v7685
  %v7687 = vpop.f32.mrb[0].mxu0
  %7688 = vmatprep.mubr.f32.mxu0 0.0
  %7689 = vmatmul.mubr.f32.gmra.mrb[0].mxu0 %v7356
  %v7690 = vpop.f32.mrb[0].mxu0
  %v7691 = vadd.f32 0.0, %v7690
  %v7692 = vpop.f32.mrb[0].mxu0
  %7693 = vmatprep.mubr.f32.mxu0 0.0
  %7694 = vmatmul.mubr.f32.gmra.mrb[0].mxu0 %v7359
  %v7695 = vpop.f32.mrb[0].mxu0
  %v7696 = vadd.f32 0.0, %v7695
  %v7697 = vpop.f32.mrb[0].mxu0
  %7698 = vmatprep.mubr.f32.mxu0 0.0
  %7699 = vmatmul.mubr.f32.gmra.mrb[0].mxu0 %v7362
  %v7700 = vpop.f32.mrb[0].mxu0
  %v7701 = vadd.f32 0.0, %v7700
  %v7702 = vpop.f32.mrb[0].mxu0
  %7703 = vmatprep.mubr.f32.mxu0 0.0
  %7704 = vmatmul.mubr.f32.gmra.mrb[0].mxu0 %v7365
  %v7705 = vpop.f32.mrb[0].mxu0
  %v7706 = vadd.f32 0.0, %v7705
  %v7707 = vpop.f32.mrb[0].mxu0
  %7708 = vmatprep.mubr.f32.mxu0 0.0
  %7709 = vmatmul.mubr.f32.gmra.mrb[0].mxu0 %v7368
  %v7710 = vpop.f32.mrb[0].mxu0
  %v7711 = vadd.f32 0.0, %v7710
  %v7712 = vpop.f32.mrb[0].mxu0
  %7713 = vmatprep.mubr.f32.mxu0 0.0
  %7714 = vmatmul.mubr.f32.gmra.mrb[0].mxu0 %v7371
  %v7715 = vpop.f32.mrb[0].mxu0
  %v7716 = vadd.f32 0.0, %v7715
  %v7717 = vpop.f32.mrb[0].mxu0
  %7718 = vmatprep.mubr.f32.mxu0 0.0
  %7719 = vmatmul.mubr.f32.gmra.mrb[0].mxu0 %v7374
  %v7720 = vpop.f32.mrb[0].mxu0
  %v7721 = vadd.f32 0.0, %v7720
  %v7722 = vpop.f32.mrb[0].mxu0
  %7723 = vmatprep.mubr.f32.mxu0 0.0
  %7724 = vmatmul.mubr.f32.gmra.mrb[0].mxu0 %v7377
  %v7725 = vpop.f32.mrb[0].mxu0
  %v7726 = vadd.f32 0.0, %v7725
  %v7727 = vpop.f32.mrb[0].mxu0
  %7728 = vmatprep.mubr.f32.mxu0 0.0
  %7729 = vmatmul.mubr.f32.gmra.mrb[0].mxu0 %v7380
  %v7730 = vpop.f32.mrb[0].mxu0
  %v7731 = vadd.f32 0.0, %v7730
  %v7732 = vpop.f32.mrb[0].mxu0
  %7733 = vmatprep.mubr.f32.mxu0 0.0
  %7734 = vmatmul.mubr.f32.gmra.mrb[0].mxu0 %v7383
  %v7735 = vpop.f32.mrb[0].mxu0
  %v7736 = vadd.f32 0.0, %v7735
  %v7737 = vpop.f32.mrb[0].mxu0
  %7738 = vmatprep.mubr.f32.mxu0 0.0
  %7739 = vmatmul.mubr.f32.gmra.mrb[0].mxu0 %v7386
  %v7740 = vpop.f32.mrb[0].mxu0
  %v7741 = vadd.f32 0.0, %v7740
  %v7742 = vpop.f32.mrb[0].mxu0
  %7743 = vmatprep.mubr.f32.mxu0 0.0
  %7744 = vmatmul.mubr.f32.gmra.mrb[0].mxu0 %v7389
  %v7745 = vpop.f32.mrb[0].mxu0
  %v7746 = vadd.f32 0.0, %v7745
  %v7747 = vpop.f32.mrb[0].mxu0
  %7748 = vmatprep.mubr.f32.mxu0 0.0
  %7749 = vmatmul.mubr.f32.gmra.mrb[0].mxu0 %v7392
  %v7750 = vpop.f32.mrb[0].mxu0
  %v7751 = vadd.f32 0.0, %v7750
  %v7752 = vpop.f32.mrb[0].mxu0
  %7753 = vmatprep.mubr.f32.mxu0 0.0
  %7754 = vmatmul.mubr.f32.gmra.mrb[0].mxu0 %v7395
  %v7755 = vpop.f32.mrb[0].mxu0
  %v7756 = vadd.f32 0.0, %v7755
  %v7757 = vpop.f32.mrb[0].mxu0
  %7758 = vmatprep.mubr.f32.mxu0 0.0
  %7759 = vmatmul.mubr.f32.gmra.mrb[0].mxu0 %v7398
  %v7760 = vpop.f32.mrb[0].mxu0
  %v7761 = vadd.f32 0.0, %v7760
  %v7762 = vpop.f32.mrb[0].mxu0
  %7763 = vmatprep.mubr.f32.mxu0 0.0
  %7764 = vmatmul.mubr.f32.gmra.mrb[0].mxu0 %v7401
  %v7765 = vpop.f32.mrb[0].mxu0
  %v7766 = vadd.f32 0.0, %v7765
  %v7767 = vpop.f32.mrb[0].mxu0
  %7768 = vmatprep.mubr.f32.mxu0 0.0
  %7769 = vmatmul.mubr.f32.gmra.mrb[0].mxu0 %v7404
  %v7770 = vpop.f32.mrb[0].mxu0
  %v7771 = vadd.f32 0.0, %v7770
  %v7772 = vpop.f32.mrb[0].mxu0
  %7773 = vmatprep.mubr.f32.mxu0 0.0
  %7774 = vmatmul.mubr.f32.gmra.mrb[0].mxu0 %v7407
  %v7775 = vpop.f32.mrb[0].mxu0
  %v7776 = vadd.f32 0.0, %v7775
  %v7777 = vpop.f32.mrb[0].mxu0
  %7778 = vmatprep.mubr.f32.mxu0 0.0
  %7779 = vmatmul.mubr.f32.gmra.mrb[0].mxu0 %v7410
  %v7780 = vpop.f32.mrb[0].mxu0
  %v7781 = vadd.f32 0.0, %v7780
  %v7782 = vpop.f32.mrb[0].mxu0
  %7783 = vmatprep.mubr.f32.mxu0 0.0
  %7784 = vmatmul.mubr.f32.gmra.mrb[0].mxu0 %v7413
  %v7785 = vpop.f32.mrb[0].mxu0
  %v7786 = vadd.f32 0.0, %v7785
  %v7787 = vpop.f32.mrb[0].mxu0
  %7788 = vmatprep.mubr.f32.mxu0 0.0
  %7789 = vmatmul.mubr.f32.gmra.mrb[0].mxu0 %v7416
  %v7790 = vpop.f32.mrb[0].mxu0
  %v7791 = vadd.f32 0.0, %v7790
  %v7792 = vpop.f32.mrb[0].mxu0
  %7793 = vmatprep.mubr.f32.mxu0 0.0
  %7794 = vmatmul.mubr.f32.gmra.mrb[0].mxu0 %v7419
  %v7795 = vpop.f32.mrb[0].mxu0
  %v7796 = vadd.f32 0.0, %v7795
  %v7797 = vpop.f32.mrb[0].mxu0
  %7798 = vmatprep.mubr.f32.mxu0 0.0
  %7799 = vmatmul.mubr.f32.gmra.mrb[0].mxu0 %v7422
  %v7800 = vpop.f32.mrb[0].mxu0
  %v7801 = vadd.f32 0.0, %v7800
  %v7802 = vpop.f32.mrb[0].mxu0
  %7803 = vmatprep.mubr.f32.mxu0 0.0
  %7804 = vmatmul.mubr.f32.gmra.mrb[0].mxu0 %v7425
  %v7805 = vpop.f32.mrb[0].mxu0
  %v7806 = vadd.f32 0.0, %v7805
  %v7807 = vpop.f32.mrb[0].mxu0
  %7808 = vmatprep.mubr.f32.mxu0 0.0
  %7809 = vmatmul.mubr.f32.gmra.mrb[0].mxu0 %v7428
  %v7810 = vpop.f32.mrb[0].mxu0
  %v7811 = vadd.f32 0.0, %v7810
  %v7812 = vpop.f32.mrb[0].mxu0
  %7813 = vmatprep.mubr.f32.mxu0 0.0
  %7814 = vmatmul.mubr.f32.gmra.mrb[0].mxu0 %v7431
  %v7815 = vpop.f32.mrb[0].mxu0
  %v7816 = vadd.f32 0.0, %v7815
  %v7817 = vpop.f32.mrb[0].mxu0
  %7818 = vmatprep.mubr.f32.mxu0 0.0
  %7819 = vmatmul.mubr.f32.gmra.mrb[0].mxu0 %v7434
  %v7820 = vpop.f32.mrb[0].mxu0
  %v7821 = vadd.f32 0.0, %v7820
  %v7822 = vpop.f32.mrb[0].mxu0
  %7823 = vdwg.mxu0
  %v7825 = vsel %vm44, %v7116, 0
  %v7828 = vsel %vm44, %v7117, 0
  %v7831 = vsel %vm44, %v7118, 0
  %v7834 = vsel %vm44, %v7119, 0
  %v7837 = vsel %vm44, %v7120, 0
  %v7840 = vsel %vm44, %v7121, 0
  %v7843 = vsel %vm44, %v7122, 0
  %v7846 = vsel %vm44, %v7123, 0
  %v7849 = vsel %vm44, %v7124, 0
  %v7852 = vsel %vm44, %v7125, 0
  %v7855 = vsel %vm44, %v7126, 0
  %v7858 = vsel %vm44, %v7127, 0
  %v7861 = vsel %vm44, %v7128, 0
  %v7864 = vsel %vm44, %v7129, 0
  %v7867 = vsel %vm44, %v7130, 0
  %v7870 = vsel %vm44, %v7131, 0
  %v7873 = vsel %vm44, %v7132, 0
  %v7876 = vsel %vm44, %v7133, 0
  %v7879 = vsel %vm44, %v7134, 0
  %v7882 = vsel %vm44, %v7135, 0
  %v7885 = vsel %vm44, %v7136, 0
  %v7888 = vsel %vm44, %v7137, 0
  %v7891 = vsel %vm44, %v7138, 0
  %v7894 = vsel %vm44, %v7139, 0
  %v7897 = vsel %vm44, %v7140, 0
  %v7900 = vsel %vm44, %v7141, 0
  %v7903 = vsel %vm44, %v7142, 0
  %v7906 = vsel %vm44, %v7143, 0
  %v7909 = vsel %vm44, %v7144, 0
  %v7912 = vsel %vm44, %v7145, 0
  %v7915 = vsel %vm44, %v7146, 0
  %v7918 = vsel %vm44, %v7147, 0
  %v7921 = vsel %vm44, %v7148, 0
  %v7924 = vsel %vm44, %v7149, 0
  %v7927 = vsel %vm44, %v7150, 0
  %v7930 = vsel %vm44, %v7151, 0
  %v7933 = vsel %vm44, %v7152, 0
  %v7936 = vsel %vm44, %v7153, 0
  %v7939 = vsel %vm44, %v7154, 0
  %v7942 = vsel %vm44, %v7155, 0
  %v7945 = vsel %vm44, %v7156, 0
  %v7948 = vsel %vm44, %v7157, 0
  %v7951 = vsel %vm44, %v7158, 0
  %v7954 = vsel %vm44, %v7159, 0
  %v7957 = vsel %vm44, %v7160, 0
  %v7960 = vsel %vm44, %v7161, 0
  %v7963 = vsel %vm44, %v7162, 0
  %v7966 = vsel %vm44, %v7163, 0
  %v7969 = vsel %vm44, %v7164, 0
  %v7972 = vsel %vm44, %v7165, 0
  %v7975 = vsel %vm44, %v7166, 0
  %v7978 = vsel %vm44, %v7167, 0
  %v7981 = vsel %vm44, %v7168, 0
  %v7984 = vsel %vm44, %v7169, 0
  %v7987 = vsel %vm44, %v7170, 0
  %v7990 = vsel %vm44, %v7171, 0
  %v7993 = vsel %vm44, %v7172, 0
  %v7996 = vsel %vm44, %v7173, 0
  %v7999 = vsel %vm44, %v7174, 0
  %v8002 = vsel %vm44, %v7175, 0
  %v8005 = vsel %vm44, %v7176, 0
  %v8008 = vsel %vm44, %v7177, 0
  %v8011 = vsel %vm44, %v7178, 0
  %v8014 = vsel %vm44, %v7179, 0
  %v8017 = vsel %vm581, %v35, 0
  %8019 = vmatprep.subr.mxu0 0.0
  %8020 = vmatpush1.msra.mxu0 %v8017
  %8021 = vmatprep.subr.mxu0 0.0
  %8022 = vmatpush1.msra.mxu0 0.0
  %8023 = vmatprep.subr.mxu0 0.0
  %8024 = vmatpush1.msra.mxu0 0.0
  %8025 = vmatprep.subr.mxu0 0.0
  %8026 = vmatpush1.msra.mxu0 0.0
  %8027 = vmatprep.subr.mxu0 0.0
  %8028 = vmatpush1.msra.mxu0 0.0
  %8029 = vmatprep.subr.mxu0 0.0
  %8030 = vmatpush1.msra.mxu0 0.0
  %8031 = vmatprep.subr.mxu0 0.0
  %8032 = vmatpush1.msra.mxu0 0.0
  %8033 = vmatprep.subr.mxu0 0.0
  %8034 = vmatpush1.msra.mxu0 0.0
  %8035 = vmatprep.subr.mxu0 0.0
  %8036 = vmatpush1.msra.mxu0 0.0
  %8037 = vmatprep.subr.mxu0 0.0
  %8038 = vmatpush1.msra.mxu0 0.0
  %8039 = vmatprep.subr.mxu0 0.0
  %8040 = vmatpush1.msra.mxu0 0.0
  %8041 = vmatprep.subr.mxu0 0.0
  %8042 = vmatpush1.msra.mxu0 0.0
  %8043 = vmatprep.subr.mxu0 0.0
  %8044 = vmatpush1.msra.mxu0 0.0
  %8045 = vmatprep.subr.mxu0 0.0
  %8046 = vmatpush1.msra.mxu0 0.0
  %8047 = vmatprep.subr.mxu0 0.0
  %8048 = vmatpush1.msra.mxu0 0.0
  %8049 = vmatprep.subr.mxu0 0.0
  %8050 = vmatpush1.msra.mxu0 0.0
  %8051 = vmatprep.subr.mxu0 0.0
  %8052 = vmatpush1.msra.mxu0 0.0
  %8053 = vmatprep.subr.mxu0 0.0
  %8054 = vmatpush1.msra.mxu0 0.0
  %8055 = vmatprep.subr.mxu0 0.0
  %8056 = vmatpush1.msra.mxu0 0.0
  %8057 = vmatprep.subr.mxu0 0.0
  %8058 = vmatpush1.msra.mxu0 0.0
  %8059 = vmatprep.subr.mxu0 0.0
  %8060 = vmatpush1.msra.mxu0 0.0
  %8061 = vmatprep.subr.mxu0 0.0
  %8062 = vmatpush1.msra.mxu0 0.0
  %8063 = vmatprep.subr.mxu0 0.0
  %8064 = vmatpush1.msra.mxu0 0.0
  %8065 = vmatprep.subr.mxu0 0.0
  %8066 = vmatpush1.msra.mxu0 0.0
  %8067 = vmatprep.subr.mxu0 0.0
  %8068 = vmatpush1.msra.mxu0 0.0
  %8069 = vmatprep.subr.mxu0 0.0
  %8070 = vmatpush1.msra.mxu0 0.0
  %8071 = vmatprep.subr.mxu0 0.0
  %8072 = vmatpush1.msra.mxu0 0.0
  %8073 = vmatprep.subr.mxu0 0.0
  %8074 = vmatpush1.msra.mxu0 0.0
  %8075 = vmatprep.subr.mxu0 0.0
  %8076 = vmatpush1.msra.mxu0 0.0
  %8077 = vmatprep.subr.mxu0 0.0
  %8078 = vmatpush1.msra.mxu0 0.0
  %8079 = vmatprep.subr.mxu0 0.0
  %8080 = vmatpush1.msra.mxu0 0.0
  %8081 = vmatprep.subr.mxu0 0.0
  %8082 = vmatpush1.msra.mxu0 0.0
  %8083 = vmatprep.mubr.f32.mxu0 0.0
  %8084 = vmatmul.mubr.f32.gmra.mrb[0].mxu0 %v7825
  %v8085 = vpop.f32.mrb[0].mxu0
  %v8086 = vadd.f32 %v7506, %v8085
  %v8087 = vpop.f32.mrb[0].mxu0
  %8088 = vmatprep.mubr.f32.mxu0 0.0
  %8089 = vmatmul.mubr.f32.gmra.mrb[0].mxu0 %v7828
  %v8090 = vpop.f32.mrb[0].mxu0
  %v8091 = vadd.f32 %v7511, %v8090
  %v8092 = vpop.f32.mrb[0].mxu0
  %8093 = vmatprep.mubr.f32.mxu0 0.0
  %8094 = vmatmul.mubr.f32.gmra.mrb[0].mxu0 %v7831
  %v8095 = vpop.f32.mrb[0].mxu0
  %v8096 = vadd.f32 %v7516, %v8095
  %v8097 = vpop.f32.mrb[0].mxu0
  %8098 = vmatprep.mubr.f32.mxu0 0.0
  %8099 = vmatmul.mubr.f32.gmra.mrb[0].mxu0 %v7834
  %v8100 = vpop.f32.mrb[0].mxu0
  %v8101 = vadd.f32 %v7521, %v8100
  %v8102 = vpop.f32.mrb[0].mxu0
  %8103 = vmatprep.mubr.f32.mxu0 0.0
  %8104 = vmatmul.mubr.f32.gmra.mrb[0].mxu0 %v7837
  %v8105 = vpop.f32.mrb[0].mxu0
  %v8106 = vadd.f32 %v7526, %v8105
  %v8107 = vpop.f32.mrb[0].mxu0
  %8108 = vmatprep.mubr.f32.mxu0 0.0
  %8109 = vmatmul.mubr.f32.gmra.mrb[0].mxu0 %v7840
  %v8110 = vpop.f32.mrb[0].mxu0
  %v8111 = vadd.f32 %v7531, %v8110
  %v8112 = vpop.f32.mrb[0].mxu0
  %8113 = vmatprep.mubr.f32.mxu0 0.0
  %8114 = vmatmul.mubr.f32.gmra.mrb[0].mxu0 %v7843
  %v8115 = vpop.f32.mrb[0].mxu0
  %v8116 = vadd.f32 %v7536, %v8115
  %v8117 = vpop.f32.mrb[0].mxu0
  %8118 = vmatprep.mubr.f32.mxu0 0.0
  %8119 = vmatmul.mubr.f32.gmra.mrb[0].mxu0 %v7846
  %v8120 = vpop.f32.mrb[0].mxu0
  %v8121 = vadd.f32 %v7541, %v8120
  %v8122 = vpop.f32.mrb[0].mxu0
  %8123 = vmatprep.mubr.f32.mxu0 0.0
  %8124 = vmatmul.mubr.f32.gmra.mrb[0].mxu0 %v7849
  %v8125 = vpop.f32.mrb[0].mxu0
  %v8126 = vadd.f32 %v7546, %v8125
  %v8127 = vpop.f32.mrb[0].mxu0
  %8128 = vmatprep.mubr.f32.mxu0 0.0
  %8129 = vmatmul.mubr.f32.gmra.mrb[0].mxu0 %v7852
  %v8130 = vpop.f32.mrb[0].mxu0
  %v8131 = vadd.f32 %v7551, %v8130
  %v8132 = vpop.f32.mrb[0].mxu0
  %8133 = vmatprep.mubr.f32.mxu0 0.0
  %8134 = vmatmul.mubr.f32.gmra.mrb[0].mxu0 %v7855
  %v8135 = vpop.f32.mrb[0].mxu0
  %v8136 = vadd.f32 %v7556, %v8135
  %v8137 = vpop.f32.mrb[0].mxu0
  %8138 = vmatprep.mubr.f32.mxu0 0.0
  %8139 = vmatmul.mubr.f32.gmra.mrb[0].mxu0 %v7858
  %v8140 = vpop.f32.mrb[0].mxu0
  %v8141 = vadd.f32 %v7561, %v8140
  %v8142 = vpop.f32.mrb[0].mxu0
  %8143 = vmatprep.mubr.f32.mxu0 0.0
  %8144 = vmatmul.mubr.f32.gmra.mrb[0].mxu0 %v7861
  %v8145 = vpop.f32.mrb[0].mxu0
  %v8146 = vadd.f32 %v7566, %v8145
  %v8147 = vpop.f32.mrb[0].mxu0
  %8148 = vmatprep.mubr.f32.mxu0 0.0
  %8149 = vmatmul.mubr.f32.gmra.mrb[0].mxu0 %v7864
  %v8150 = vpop.f32.mrb[0].mxu0
  %v8151 = vadd.f32 %v7571, %v8150
  %v8152 = vpop.f32.mrb[0].mxu0
  %8153 = vmatprep.mubr.f32.mxu0 0.0
  %8154 = vmatmul.mubr.f32.gmra.mrb[0].mxu0 %v7867
  %v8155 = vpop.f32.mrb[0].mxu0
  %v8156 = vadd.f32 %v7576, %v8155
  %v8157 = vpop.f32.mrb[0].mxu0
  %8158 = vmatprep.mubr.f32.mxu0 0.0
  %8159 = vmatmul.mubr.f32.gmra.mrb[0].mxu0 %v7870
  %v8160 = vpop.f32.mrb[0].mxu0
  %v8161 = vadd.f32 %v7581, %v8160
  %v8162 = vpop.f32.mrb[0].mxu0
  %8163 = vmatprep.mubr.f32.mxu0 0.0
  %8164 = vmatmul.mubr.f32.gmra.mrb[0].mxu0 %v7873
  %v8165 = vpop.f32.mrb[0].mxu0
  %v8166 = vadd.f32 %v7586, %v8165
  %v8167 = vpop.f32.mrb[0].mxu0
  %8168 = vmatprep.mubr.f32.mxu0 0.0
  %8169 = vmatmul.mubr.f32.gmra.mrb[0].mxu0 %v7876
  %v8170 = vpop.f32.mrb[0].mxu0
  %v8171 = vadd.f32 %v7591, %v8170
  %v8172 = vpop.f32.mrb[0].mxu0
  %8173 = vmatprep.mubr.f32.mxu0 0.0
  %8174 = vmatmul.mubr.f32.gmra.mrb[0].mxu0 %v7879
  %v8175 = vpop.f32.mrb[0].mxu0
  %v8176 = vadd.f32 %v7596, %v8175
  %v8177 = vpop.f32.mrb[0].mxu0
  %8178 = vmatprep.mubr.f32.mxu0 0.0
  %8179 = vmatmul.mubr.f32.gmra.mrb[0].mxu0 %v7882
  %v8180 = vpop.f32.mrb[0].mxu0
  %v8181 = vadd.f32 %v7601, %v8180
  %v8182 = vpop.f32.mrb[0].mxu0
  %8183 = vmatprep.mubr.f32.mxu0 0.0
  %8184 = vmatmul.mubr.f32.gmra.mrb[0].mxu0 %v7885
  %v8185 = vpop.f32.mrb[0].mxu0
  %v8186 = vadd.f32 %v7606, %v8185
  %v8187 = vpop.f32.mrb[0].mxu0
  %8188 = vmatprep.mubr.f32.mxu0 0.0
  %8189 = vmatmul.mubr.f32.gmra.mrb[0].mxu0 %v7888
  %v8190 = vpop.f32.mrb[0].mxu0
  %v8191 = vadd.f32 %v7611, %v8190
  %v8192 = vpop.f32.mrb[0].mxu0
  %8193 = vmatprep.mubr.f32.mxu0 0.0
  %8194 = vmatmul.mubr.f32.gmra.mrb[0].mxu0 %v7891
  %v8195 = vpop.f32.mrb[0].mxu0
  %v8196 = vadd.f32 %v7616, %v8195
  %v8197 = vpop.f32.mrb[0].mxu0
  %8198 = vmatprep.mubr.f32.mxu0 0.0
  %8199 = vmatmul.mubr.f32.gmra.mrb[0].mxu0 %v7894
  %v8200 = vpop.f32.mrb[0].mxu0
  %v8201 = vadd.f32 %v7621, %v8200
  %v8202 = vpop.f32.mrb[0].mxu0
  %8203 = vmatprep.mubr.f32.mxu0 0.0
  %8204 = vmatmul.mubr.f32.gmra.mrb[0].mxu0 %v7897
  %v8205 = vpop.f32.mrb[0].mxu0
  %v8206 = vadd.f32 %v7626, %v8205
  %v8207 = vpop.f32.mrb[0].mxu0
  %8208 = vmatprep.mubr.f32.mxu0 0.0
  %8209 = vmatmul.mubr.f32.gmra.mrb[0].mxu0 %v7900
  %v8210 = vpop.f32.mrb[0].mxu0
  %v8211 = vadd.f32 %v7631, %v8210
  %v8212 = vpop.f32.mrb[0].mxu0
  %8213 = vmatprep.mubr.f32.mxu0 0.0
  %8214 = vmatmul.mubr.f32.gmra.mrb[0].mxu0 %v7903
  %v8215 = vpop.f32.mrb[0].mxu0
  %v8216 = vadd.f32 %v7636, %v8215
  %v8217 = vpop.f32.mrb[0].mxu0
  %8218 = vmatprep.mubr.f32.mxu0 0.0
  %8219 = vmatmul.mubr.f32.gmra.mrb[0].mxu0 %v7906
  %v8220 = vpop.f32.mrb[0].mxu0
  %v8221 = vadd.f32 %v7641, %v8220
  %v8222 = vpop.f32.mrb[0].mxu0
  %8223 = vmatprep.mubr.f32.mxu0 0.0
  %8224 = vmatmul.mubr.f32.gmra.mrb[0].mxu0 %v7909
  %v8225 = vpop.f32.mrb[0].mxu0
  %v8226 = vadd.f32 %v7646, %v8225
  %v8227 = vpop.f32.mrb[0].mxu0
  %8228 = vmatprep.mubr.f32.mxu0 0.0
  %8229 = vmatmul.mubr.f32.gmra.mrb[0].mxu0 %v7912
  %v8230 = vpop.f32.mrb[0].mxu0
  %v8231 = vadd.f32 %v7651, %v8230
  %v8232 = vpop.f32.mrb[0].mxu0
  %8233 = vmatprep.mubr.f32.mxu0 0.0
  %8234 = vmatmul.mubr.f32.gmra.mrb[0].mxu0 %v7915
  %v8235 = vpop.f32.mrb[0].mxu0
  %v8236 = vadd.f32 %v7656, %v8235
  %v8237 = vpop.f32.mrb[0].mxu0
  %8238 = vmatprep.mubr.f32.mxu0 0.0
  %8239 = vmatmul.mubr.f32.gmra.mrb[0].mxu0 %v7918
  %v8240 = vpop.f32.mrb[0].mxu0
  %v8241 = vadd.f32 %v7661, %v8240
  %v8242 = vpop.f32.mrb[0].mxu0
  %8243 = vmatprep.mubr.f32.mxu0 0.0
  %8244 = vmatmul.mubr.f32.gmra.mrb[0].mxu0 %v7921
  %v8245 = vpop.f32.mrb[0].mxu0
  %v8246 = vadd.f32 %v7666, %v8245
  %v8247 = vpop.f32.mrb[0].mxu0
  %8248 = vmatprep.mubr.f32.mxu0 0.0
  %8249 = vmatmul.mubr.f32.gmra.mrb[0].mxu0 %v7924
  %v8250 = vpop.f32.mrb[0].mxu0
  %v8251 = vadd.f32 %v7671, %v8250
  %v8252 = vpop.f32.mrb[0].mxu0
  %8253 = vmatprep.mubr.f32.mxu0 0.0
  %8254 = vmatmul.mubr.f32.gmra.mrb[0].mxu0 %v7927
  %v8255 = vpop.f32.mrb[0].mxu0
  %v8256 = vadd.f32 %v7676, %v8255
  %v8257 = vpop.f32.mrb[0].mxu0
  %8258 = vmatprep.mubr.f32.mxu0 0.0
  %8259 = vmatmul.mubr.f32.gmra.mrb[0].mxu0 %v7930
  %v8260 = vpop.f32.mrb[0].mxu0
  %v8261 = vadd.f32 %v7681, %v8260
  %v8262 = vpop.f32.mrb[0].mxu0
  %8263 = vmatprep.mubr.f32.mxu0 0.0
  %8264 = vmatmul.mubr.f32.gmra.mrb[0].mxu0 %v7933
  %v8265 = vpop.f32.mrb[0].mxu0
  %v8266 = vadd.f32 %v7686, %v8265
  %v8267 = vpop.f32.mrb[0].mxu0
  %8268 = vmatprep.mubr.f32.mxu0 0.0
  %8269 = vmatmul.mubr.f32.gmra.mrb[0].mxu0 %v7936
  %v8270 = vpop.f32.mrb[0].mxu0
  %v8271 = vadd.f32 %v7691, %v8270
  %v8272 = vpop.f32.mrb[0].mxu0
  %8273 = vmatprep.mubr.f32.mxu0 0.0
  %8274 = vmatmul.mubr.f32.gmra.mrb[0].mxu0 %v7939
  %v8275 = vpop.f32.mrb[0].mxu0
  %v8276 = vadd.f32 %v7696, %v8275
  %v8277 = vpop.f32.mrb[0].mxu0
  %8278 = vmatprep.mubr.f32.mxu0 0.0
  %8279 = vmatmul.mubr.f32.gmra.mrb[0].mxu0 %v7942
  %v8280 = vpop.f32.mrb[0].mxu0
  %v8281 = vadd.f32 %v7701, %v8280
  %v8282 = vpop.f32.mrb[0].mxu0
  %8283 = vmatprep.mubr.f32.mxu0 0.0
  %8284 = vmatmul.mubr.f32.gmra.mrb[0].mxu0 %v7945
  %v8285 = vpop.f32.mrb[0].mxu0
  %v8286 = vadd.f32 %v7706, %v8285
  %v8287 = vpop.f32.mrb[0].mxu0
  %8288 = vmatprep.mubr.f32.mxu0 0.0
  %8289 = vmatmul.mubr.f32.gmra.mrb[0].mxu0 %v7948
  %v8290 = vpop.f32.mrb[0].mxu0
  %v8291 = vadd.f32 %v7711, %v8290
  %v8292 = vpop.f32.mrb[0].mxu0
  %8293 = vmatprep.mubr.f32.mxu0 0.0
  %8294 = vmatmul.mubr.f32.gmra.mrb[0].mxu0 %v7951
  %v8295 = vpop.f32.mrb[0].mxu0
  %v8296 = vadd.f32 %v7716, %v8295
  %v8297 = vpop.f32.mrb[0].mxu0
  %8298 = vmatprep.mubr.f32.mxu0 0.0
  %8299 = vmatmul.mubr.f32.gmra.mrb[0].mxu0 %v7954
  %v8300 = vpop.f32.mrb[0].mxu0
  %v8301 = vadd.f32 %v7721, %v8300
  %v8302 = vpop.f32.mrb[0].mxu0
  %8303 = vmatprep.mubr.f32.mxu0 0.0
  %8304 = vmatmul.mubr.f32.gmra.mrb[0].mxu0 %v7957
  %v8305 = vpop.f32.mrb[0].mxu0
  %v8306 = vadd.f32 %v7726, %v8305
  %v8307 = vpop.f32.mrb[0].mxu0
  %8308 = vmatprep.mubr.f32.mxu0 0.0
  %8309 = vmatmul.mubr.f32.gmra.mrb[0].mxu0 %v7960
  %v8310 = vpop.f32.mrb[0].mxu0
  %v8311 = vadd.f32 %v7731, %v8310
  %v8312 = vpop.f32.mrb[0].mxu0
  %8313 = vmatprep.mubr.f32.mxu0 0.0
  %8314 = vmatmul.mubr.f32.gmra.mrb[0].mxu0 %v7963
  %v8315 = vpop.f32.mrb[0].mxu0
  %v8316 = vadd.f32 %v7736, %v8315
  %v8317 = vpop.f32.mrb[0].mxu0
  %8318 = vmatprep.mubr.f32.mxu0 0.0
  %8319 = vmatmul.mubr.f32.gmra.mrb[0].mxu0 %v7966
  %v8320 = vpop.f32.mrb[0].mxu0
  %v8321 = vadd.f32 %v7741, %v8320
  %v8322 = vpop.f32.mrb[0].mxu0
  %8323 = vmatprep.mubr.f32.mxu0 0.0
  %8324 = vmatmul.mubr.f32.gmra.mrb[0].mxu0 %v7969
  %v8325 = vpop.f32.mrb[0].mxu0
  %v8326 = vadd.f32 %v7746, %v8325
  %v8327 = vpop.f32.mrb[0].mxu0
  %8328 = vmatprep.mubr.f32.mxu0 0.0
  %8329 = vmatmul.mubr.f32.gmra.mrb[0].mxu0 %v7972
  %v8330 = vpop.f32.mrb[0].mxu0
  %v8331 = vadd.f32 %v7751, %v8330
  %v8332 = vpop.f32.mrb[0].mxu0
  %8333 = vmatprep.mubr.f32.mxu0 0.0
  %8334 = vmatmul.mubr.f32.gmra.mrb[0].mxu0 %v7975
  %v8335 = vpop.f32.mrb[0].mxu0
  %v8336 = vadd.f32 %v7756, %v8335
  %v8337 = vpop.f32.mrb[0].mxu0
  %8338 = vmatprep.mubr.f32.mxu0 0.0
  %8339 = vmatmul.mubr.f32.gmra.mrb[0].mxu0 %v7978
  %v8340 = vpop.f32.mrb[0].mxu0
  %v8341 = vadd.f32 %v7761, %v8340
  %v8342 = vpop.f32.mrb[0].mxu0
  %8343 = vmatprep.mubr.f32.mxu0 0.0
  %8344 = vmatmul.mubr.f32.gmra.mrb[0].mxu0 %v7981
  %v8345 = vpop.f32.mrb[0].mxu0
  %v8346 = vadd.f32 %v7766, %v8345
  %v8347 = vpop.f32.mrb[0].mxu0
  %8348 = vmatprep.mubr.f32.mxu0 0.0
  %8349 = vmatmul.mubr.f32.gmra.mrb[0].mxu0 %v7984
  %v8350 = vpop.f32.mrb[0].mxu0
  %v8351 = vadd.f32 %v7771, %v8350
  %v8352 = vpop.f32.mrb[0].mxu0
  %8353 = vmatprep.mubr.f32.mxu0 0.0
  %8354 = vmatmul.mubr.f32.gmra.mrb[0].mxu0 %v7987
  %v8355 = vpop.f32.mrb[0].mxu0
  %v8356 = vadd.f32 %v7776, %v8355
  %v8357 = vpop.f32.mrb[0].mxu0
  %8358 = vmatprep.mubr.f32.mxu0 0.0
  %8359 = vmatmul.mubr.f32.gmra.mrb[0].mxu0 %v7990
  %v8360 = vpop.f32.mrb[0].mxu0
  %v8361 = vadd.f32 %v7781, %v8360
  %v8362 = vpop.f32.mrb[0].mxu0
  %8363 = vmatprep.mubr.f32.mxu0 0.0
  %8364 = vmatmul.mubr.f32.gmra.mrb[0].mxu0 %v7993
  %v8365 = vpop.f32.mrb[0].mxu0
  %v8366 = vadd.f32 %v7786, %v8365
  %v8367 = vpop.f32.mrb[0].mxu0
  %8368 = vmatprep.mubr.f32.mxu0 0.0
  %8369 = vmatmul.mubr.f32.gmra.mrb[0].mxu0 %v7996
  %v8370 = vpop.f32.mrb[0].mxu0
  %v8371 = vadd.f32 %v7791, %v8370
  %v8372 = vpop.f32.mrb[0].mxu0
  %8373 = vmatprep.mubr.f32.mxu0 0.0
  %8374 = vmatmul.mubr.f32.gmra.mrb[0].mxu0 %v7999
  %v8375 = vpop.f32.mrb[0].mxu0
  %v8376 = vadd.f32 %v7796, %v8375
  %v8377 = vpop.f32.mrb[0].mxu0
  %8378 = vmatprep.mubr.f32.mxu0 0.0
  %8379 = vmatmul.mubr.f32.gmra.mrb[0].mxu0 %v8002
  %v8380 = vpop.f32.mrb[0].mxu0
  %v8381 = vadd.f32 %v7801, %v8380
  %v8382 = vpop.f32.mrb[0].mxu0
  %8383 = vmatprep.mubr.f32.mxu0 0.0
  %8384 = vmatmul.mubr.f32.gmra.mrb[0].mxu0 %v8005
  %v8385 = vpop.f32.mrb[0].mxu0
  %v8386 = vadd.f32 %v7806, %v8385
  %v8387 = vpop.f32.mrb[0].mxu0
  %8388 = vmatprep.mubr.f32.mxu0 0.0
  %8389 = vmatmul.mubr.f32.gmra.mrb[0].mxu0 %v8008
  %v8390 = vpop.f32.mrb[0].mxu0
  %v8391 = vadd.f32 %v7811, %v8390
  %v8392 = vpop.f32.mrb[0].mxu0
  %8393 = vmatprep.mubr.f32.mxu0 0.0
  %8394 = vmatmul.mubr.f32.gmra.mrb[0].mxu0 %v8011
  %v8395 = vpop.f32.mrb[0].mxu0
  %v8396 = vadd.f32 %v7816, %v8395
  %v8397 = vpop.f32.mrb[0].mxu0
  %8398 = vmatprep.mubr.f32.mxu0 0.0
  %8399 = vmatmul.mubr.f32.gmra.mrb[0].mxu0 %v8014
  %v8400 = vpop.f32.mrb[0].mxu0
  %v8401 = vadd.f32 %v7821, %v8400
  %v8402 = vpop.f32.mrb[0].mxu0
  %8403 = vdwg.mxu0
  %v8404 = vld [vmem:[#allocation2 + $0x2] sm:$0xff]
  %v8405 = vld [vmem:[#allocation2 + $0xa] sm:$0xff]
  %v8406 = vld [vmem:[#allocation2 + $0x1a] sm:$0xff]
  %v8407 = vld [vmem:[#allocation2 + $0x22] sm:$0xff]
  %v8408 = vld [vmem:[#allocation2 + $0x32] sm:$0xff]
  %v8409 = vld [vmem:[#allocation2 + $0x3a] sm:$0xff]
  %v8410 = vld [vmem:[#allocation2 + $0x4a] sm:$0xff]
  %v8411 = vld [vmem:[#allocation2 + $0x52] sm:$0xff]
  %v8412 = vld [vmem:[#allocation2 + $0x62] sm:$0xff]
  %v8413 = vld [vmem:[#allocation2 + $0x6a] sm:$0xff]
  %v8414 = vld [vmem:[#allocation2 + $0x7a] sm:$0xff]
  %v8415 = vld [vmem:[#allocation2 + $0x82] sm:$0xff]
  %v8416 = vld [vmem:[#allocation2 + $0x92] sm:$0xff]
  %v8417 = vld [vmem:[#allocation2 + $0x9a] sm:$0xff]
  %v8418 = vld [vmem:[#allocation2 + $0xaa] sm:$0xff]
  %v8419 = vld [vmem:[#allocation2 + $0xb2] sm:$0xff]
  %v8420 = vld [vmem:[#allocation2 + $0xc2] sm:$0xff]
  %v8421 = vld [vmem:[#allocation2 + $0xca] sm:$0xff]
  %v8422 = vld [vmem:[#allocation2 + $0xda] sm:$0xff]
  %v8423 = vld [vmem:[#allocation2 + $0xe2] sm:$0xff]
  %v8424 = vld [vmem:[#allocation2 + $0xf2] sm:$0xff]
  %v8425 = vld [vmem:[#allocation2 + $0xfa] sm:$0xff]
  %v8426 = vld [vmem:[#allocation2 + $0x10a] sm:$0xff]
  %v8427 = vld [vmem:[#allocation2 + $0x112] sm:$0xff]
  %v8428 = vld [vmem:[#allocation2 + $0x122] sm:$0xff]
  %v8429 = vld [vmem:[#allocation2 + $0x12a] sm:$0xff]
  %v8430 = vld [vmem:[#allocation2 + $0x13a] sm:$0xff]
  %v8431 = vld [vmem:[#allocation2 + $0x142] sm:$0xff]
  %v8432 = vld [vmem:[#allocation2 + $0x152] sm:$0xff]
  %v8433 = vld [vmem:[#allocation2 + $0x15a] sm:$0xff]
  %v8434 = vld [vmem:[#allocation2 + $0x16a] sm:$0xff]
  %v8435 = vld [vmem:[#allocation2 + $0x172] sm:$0xff]
  %v8436 = vld [vmem:[#allocation2 + $0x1b2] sm:$0xff]
  %v8437 = vld [vmem:[#allocation2 + $0x1ba] sm:$0xff]
  %v8438 = vld [vmem:[#allocation2 + $0x1ca] sm:$0xff]
  %v8439 = vld [vmem:[#allocation2 + $0x1d2] sm:$0xff]
  %v8440 = vld [vmem:[#allocation2 + $0x1e2] sm:$0xff]
  %v8441 = vld [vmem:[#allocation2 + $0x1ea] sm:$0xff]
  %v8442 = vld [vmem:[#allocation2 + $0x1fa] sm:$0xff]
  %v8443 = vld [vmem:[#allocation2 + $0x202] sm:$0xff]
  %v8444 = vld [vmem:[#allocation2 + $0x212] sm:$0xff]
  %v8445 = vld [vmem:[#allocation2 + $0x21a] sm:$0xff]
  %v8446 = vld [vmem:[#allocation2 + $0x22a] sm:$0xff]
  %v8447 = vld [vmem:[#allocation2 + $0x232] sm:$0xff]
  %v8448 = vld [vmem:[#allocation2 + $0x242] sm:$0xff]
  %v8449 = vld [vmem:[#allocation2 + $0x24a] sm:$0xff]
  %v8450 = vld [vmem:[#allocation2 + $0x25a] sm:$0xff]
  %v8451 = vld [vmem:[#allocation2 + $0x262] sm:$0xff]
  %v8452 = vld [vmem:[#allocation2 + $0x272] sm:$0xff]
  %v8453 = vld [vmem:[#allocation2 + $0x27a] sm:$0xff]
  %v8454 = vld [vmem:[#allocation2 + $0x28a] sm:$0xff]
  %v8455 = vld [vmem:[#allocation2 + $0x292] sm:$0xff]
  %v8456 = vld [vmem:[#allocation2 + $0x2a2] sm:$0xff]
  %v8457 = vld [vmem:[#allocation2 + $0x2aa] sm:$0xff]
  %v8458 = vld [vmem:[#allocation2 + $0x2ba] sm:$0xff]
  %v8459 = vld [vmem:[#allocation2 + $0x2c2] sm:$0xff]
  %v8460 = vld [vmem:[#allocation2 + $0x2d2] sm:$0xff]
  %v8461 = vld [vmem:[#allocation2 + $0x2da] sm:$0xff]
  %v8462 = vld [vmem:[#allocation2 + $0x2ea] sm:$0xff]
  %v8463 = vld [vmem:[#allocation2 + $0x2f2] sm:$0xff]
  %v8464 = vld [vmem:[#allocation2 + $0x302] sm:$0xff]
  %v8465 = vld [vmem:[#allocation2 + $0x30a] sm:$0xff]
  %v8466 = vld [vmem:[#allocation2 + $0x31a] sm:$0xff]
  %v8467 = vld [vmem:[#allocation2 + $0x322] sm:$0xff]
  %v8469 = vsel %vm44, %v8404, 0
  %v8472 = vsel %vm44, %v8405, 0
  %v8475 = vsel %vm44, %v8406, 0
  %v8478 = vsel %vm44, %v8407, 0
  %v8481 = vsel %vm44, %v8408, 0
  %v8484 = vsel %vm44, %v8409, 0
  %v8487 = vsel %vm44, %v8410, 0
  %v8490 = vsel %vm44, %v8411, 0
  %v8493 = vsel %vm44, %v8412, 0
  %v8496 = vsel %vm44, %v8413, 0
  %v8499 = vsel %vm44, %v8414, 0
  %v8502 = vsel %vm44, %v8415, 0
  %v8505 = vsel %vm44, %v8416, 0
  %v8508 = vsel %vm44, %v8417, 0
  %v8511 = vsel %vm44, %v8418, 0
  %v8514 = vsel %vm44, %v8419, 0
  %v8517 = vsel %vm44, %v8420, 0
  %v8520 = vsel %vm44, %v8421, 0
  %v8523 = vsel %vm44, %v8422, 0
  %v8526 = vsel %vm44, %v8423, 0
  %v8529 = vsel %vm44, %v8424, 0
  %v8532 = vsel %vm44, %v8425, 0
  %v8535 = vsel %vm44, %v8426, 0
  %v8538 = vsel %vm44, %v8427, 0
  %v8541 = vsel %vm44, %v8428, 0
  %v8544 = vsel %vm44, %v8429, 0
  %v8547 = vsel %vm44, %v8430, 0
  %v8550 = vsel %vm44, %v8431, 0
  %v8553 = vsel %vm44, %v8432, 0
  %v8556 = vsel %vm44, %v8433, 0
  %v8559 = vsel %vm44, %v8434, 0
  %v8562 = vsel %vm44, %v8435, 0
  %v8565 = vsel %vm44, %v8436, 0
  %v8568 = vsel %vm44, %v8437, 0
  %v8571 = vsel %vm44, %v8438, 0
  %v8574 = vsel %vm44, %v8439, 0
  %v8577 = vsel %vm44, %v8440, 0
  %v8580 = vsel %vm44, %v8441, 0
  %v8583 = vsel %vm44, %v8442, 0
  %v8586 = vsel %vm44, %v8443, 0
  %v8589 = vsel %vm44, %v8444, 0
  %v8592 = vsel %vm44, %v8445, 0
  %v8595 = vsel %vm44, %v8446, 0
  %v8598 = vsel %vm44, %v8447, 0
  %v8601 = vsel %vm44, %v8448, 0
  %v8604 = vsel %vm44, %v8449, 0
  %v8607 = vsel %vm44, %v8450, 0
  %v8610 = vsel %vm44, %v8451, 0
  %v8613 = vsel %vm44, %v8452, 0
  %v8616 = vsel %vm44, %v8453, 0
  %v8619 = vsel %vm44, %v8454, 0
  %v8622 = vsel %vm44, %v8455, 0
  %v8625 = vsel %vm44, %v8456, 0
  %v8628 = vsel %vm44, %v8457, 0
  %v8631 = vsel %vm44, %v8458, 0
  %v8634 = vsel %vm44, %v8459, 0
  %v8637 = vsel %vm44, %v8460, 0
  %v8640 = vsel %vm44, %v8461, 0
  %v8643 = vsel %vm44, %v8462, 0
  %v8646 = vsel %vm44, %v8463, 0
  %v8649 = vsel %vm44, %v8464, 0
  %v8652 = vsel %vm44, %v8465, 0
  %v8655 = vsel %vm44, %v8466, 0
  %v8658 = vsel %vm44, %v8467, 0
  %v8661 = vsel %vm581, %v37, 0
  %8663 = vmatprep.subr.mxu0 0.0
  %8664 = vmatpush1.msra.mxu0 %v8661
  %8665 = vmatprep.subr.mxu0 0.0
  %8666 = vmatpush1.msra.mxu0 0.0
  %8667 = vmatprep.subr.mxu0 0.0
  %8668 = vmatpush1.msra.mxu0 0.0
  %8669 = vmatprep.subr.mxu0 0.0
  %8670 = vmatpush1.msra.mxu0 0.0
  %8671 = vmatprep.subr.mxu0 0.0
  %8672 = vmatpush1.msra.mxu0 0.0
  %8673 = vmatprep.subr.mxu0 0.0
  %8674 = vmatpush1.msra.mxu0 0.0
  %8675 = vmatprep.subr.mxu0 0.0
  %8676 = vmatpush1.msra.mxu0 0.0
  %8677 = vmatprep.subr.mxu0 0.0
  %8678 = vmatpush1.msra.mxu0 0.0
  %8679 = vmatprep.subr.mxu0 0.0
  %8680 = vmatpush1.msra.mxu0 0.0
  %8681 = vmatprep.subr.mxu0 0.0
  %8682 = vmatpush1.msra.mxu0 0.0
  %8683 = vmatprep.subr.mxu0 0.0
  %8684 = vmatpush1.msra.mxu0 0.0
  %8685 = vmatprep.subr.mxu0 0.0
  %8686 = vmatpush1.msra.mxu0 0.0
  %8687 = vmatprep.subr.mxu0 0.0
  %8688 = vmatpush1.msra.mxu0 0.0
  %8689 = vmatprep.subr.mxu0 0.0
  %8690 = vmatpush1.msra.mxu0 0.0
  %8691 = vmatprep.subr.mxu0 0.0
  %8692 = vmatpush1.msra.mxu0 0.0
  %8693 = vmatprep.subr.mxu0 0.0
  %8694 = vmatpush1.msra.mxu0 0.0
  %8695 = vmatprep.subr.mxu0 0.0
  %8696 = vmatpush1.msra.mxu0 0.0
  %8697 = vmatprep.subr.mxu0 0.0
  %8698 = vmatpush1.msra.mxu0 0.0
  %8699 = vmatprep.subr.mxu0 0.0
  %8700 = vmatpush1.msra.mxu0 0.0
  %8701 = vmatprep.subr.mxu0 0.0
  %8702 = vmatpush1.msra.mxu0 0.0
  %8703 = vmatprep.subr.mxu0 0.0
  %8704 = vmatpush1.msra.mxu0 0.0
  %8705 = vmatprep.subr.mxu0 0.0
  %8706 = vmatpush1.msra.mxu0 0.0
  %8707 = vmatprep.subr.mxu0 0.0
  %8708 = vmatpush1.msra.mxu0 0.0
  %8709 = vmatprep.subr.mxu0 0.0
  %8710 = vmatpush1.msra.mxu0 0.0
  %8711 = vmatprep.subr.mxu0 0.0
  %8712 = vmatpush1.msra.mxu0 0.0
  %8713 = vmatprep.subr.mxu0 0.0
  %8714 = vmatpush1.msra.mxu0 0.0
  %8715 = vmatprep.subr.mxu0 0.0
  %8716 = vmatpush1.msra.mxu0 0.0
  %8717 = vmatprep.subr.mxu0 0.0
  %8718 = vmatpush1.msra.mxu0 0.0
  %8719 = vmatprep.subr.mxu0 0.0
  %8720 = vmatpush1.msra.mxu0 0.0
  %8721 = vmatprep.subr.mxu0 0.0
  %8722 = vmatpush1.msra.mxu0 0.0
  %8723 = vmatprep.subr.mxu0 0.0
  %8724 = vmatpush1.msra.mxu0 0.0
  %8725 = vmatprep.subr.mxu0 0.0
  %8726 = vmatpush1.msra.mxu0 0.0
  %8727 = vmatprep.mubr.f32.mxu0 0.0
  %8728 = vmatmul.mubr.f32.gmra.mrb[0].mxu0 %v8469
  %v8729 = vpop.f32.mrb[0].mxu0
  %v8730 = vadd.f32 0.0, %v8729
  %v8731 = vpop.f32.mrb[0].mxu0
  %8732 = vmatprep.mubr.f32.mxu0 0.0
  %8733 = vmatmul.mubr.f32.gmra.mrb[0].mxu0 %v8472
  %v8734 = vpop.f32.mrb[0].mxu0
  %v8735 = vadd.f32 0.0, %v8734
  %v8736 = vpop.f32.mrb[0].mxu0
  %8737 = vmatprep.mubr.f32.mxu0 0.0
  %8738 = vmatmul.mubr.f32.gmra.mrb[0].mxu0 %v8475
  %v8739 = vpop.f32.mrb[0].mxu0
  %v8740 = vadd.f32 0.0, %v8739
  %v8741 = vpop.f32.mrb[0].mxu0
  %8742 = vmatprep.mubr.f32.mxu0 0.0
  %8743 = vmatmul.mubr.f32.gmra.mrb[0].mxu0 %v8478
  %v8744 = vpop.f32.mrb[0].mxu0
  %v8745 = vadd.f32 0.0, %v8744
  %v8746 = vpop.f32.mrb[0].mxu0
  %8747 = vmatprep.mubr.f32.mxu0 0.0
  %8748 = vmatmul.mubr.f32.gmra.mrb[0].mxu0 %v8481
  %v8749 = vpop.f32.mrb[0].mxu0
  %v8750 = vadd.f32 0.0, %v8749
  %v8751 = vpop.f32.mrb[0].mxu0
  %8752 = vmatprep.mubr.f32.mxu0 0.0
  %8753 = vmatmul.mubr.f32.gmra.mrb[0].mxu0 %v8484
  %v8754 = vpop.f32.mrb[0].mxu0
  %v8755 = vadd.f32 0.0, %v8754
  %v8756 = vpop.f32.mrb[0].mxu0
  %8757 = vmatprep.mubr.f32.mxu0 0.0
  %8758 = vmatmul.mubr.f32.gmra.mrb[0].mxu0 %v8487
  %v8759 = vpop.f32.mrb[0].mxu0
  %v8760 = vadd.f32 0.0, %v8759
  %v8761 = vpop.f32.mrb[0].mxu0
  %8762 = vmatprep.mubr.f32.mxu0 0.0
  %8763 = vmatmul.mubr.f32.gmra.mrb[0].mxu0 %v8490
  %v8764 = vpop.f32.mrb[0].mxu0
  %v8765 = vadd.f32 0.0, %v8764
  %v8766 = vpop.f32.mrb[0].mxu0
  %8767 = vmatprep.mubr.f32.mxu0 0.0
  %8768 = vmatmul.mubr.f32.gmra.mrb[0].mxu0 %v8493
  %v8769 = vpop.f32.mrb[0].mxu0
  %v8770 = vadd.f32 0.0, %v8769
  %v8771 = vpop.f32.mrb[0].mxu0
  %8772 = vmatprep.mubr.f32.mxu0 0.0
  %8773 = vmatmul.mubr.f32.gmra.mrb[0].mxu0 %v8496
  %v8774 = vpop.f32.mrb[0].mxu0
  %v8775 = vadd.f32 0.0, %v8774
  %v8776 = vpop.f32.mrb[0].mxu0
  %8777 = vmatprep.mubr.f32.mxu0 0.0
  %8778 = vmatmul.mubr.f32.gmra.mrb[0].mxu0 %v8499
  %v8779 = vpop.f32.mrb[0].mxu0
  %v8780 = vadd.f32 0.0, %v8779
  %v8781 = vpop.f32.mrb[0].mxu0
  %8782 = vmatprep.mubr.f32.mxu0 0.0
  %8783 = vmatmul.mubr.f32.gmra.mrb[0].mxu0 %v8502
  %v8784 = vpop.f32.mrb[0].mxu0
  %v8785 = vadd.f32 0.0, %v8784
  %v8786 = vpop.f32.mrb[0].mxu0
  %8787 = vmatprep.mubr.f32.mxu0 0.0
  %8788 = vmatmul.mubr.f32.gmra.mrb[0].mxu0 %v8505
  %v8789 = vpop.f32.mrb[0].mxu0
  %v8790 = vadd.f32 0.0, %v8789
  %v8791 = vpop.f32.mrb[0].mxu0
  %8792 = vmatprep.mubr.f32.mxu0 0.0
  %8793 = vmatmul.mubr.f32.gmra.mrb[0].mxu0 %v8508
  %v8794 = vpop.f32.mrb[0].mxu0
  %v8795 = vadd.f32 0.0, %v8794
  %v8796 = vpop.f32.mrb[0].mxu0
  %8797 = vmatprep.mubr.f32.mxu0 0.0
  %8798 = vmatmul.mubr.f32.gmra.mrb[0].mxu0 %v8511
  %v8799 = vpop.f32.mrb[0].mxu0
  %v8800 = vadd.f32 0.0, %v8799
  %v8801 = vpop.f32.mrb[0].mxu0
  %8802 = vmatprep.mubr.f32.mxu0 0.0
  %8803 = vmatmul.mubr.f32.gmra.mrb[0].mxu0 %v8514
  %v8804 = vpop.f32.mrb[0].mxu0
  %v8805 = vadd.f32 0.0, %v8804
  %v8806 = vpop.f32.mrb[0].mxu0
  %8807 = vmatprep.mubr.f32.mxu0 0.0
  %8808 = vmatmul.mubr.f32.gmra.mrb[0].mxu0 %v8517
  %v8809 = vpop.f32.mrb[0].mxu0
  %v8810 = vadd.f32 0.0, %v8809
  %v8811 = vpop.f32.mrb[0].mxu0
  %8812 = vmatprep.mubr.f32.mxu0 0.0
  %8813 = vmatmul.mubr.f32.gmra.mrb[0].mxu0 %v8520
  %v8814 = vpop.f32.mrb[0].mxu0
  %v8815 = vadd.f32 0.0, %v8814
  %v8816 = vpop.f32.mrb[0].mxu0
  %8817 = vmatprep.mubr.f32.mxu0 0.0
  %8818 = vmatmul.mubr.f32.gmra.mrb[0].mxu0 %v8523
  %v8819 = vpop.f32.mrb[0].mxu0
  %v8820 = vadd.f32 0.0, %v8819
  %v8821 = vpop.f32.mrb[0].mxu0
  %8822 = vmatprep.mubr.f32.mxu0 0.0
  %8823 = vmatmul.mubr.f32.gmra.mrb[0].mxu0 %v8526
  %v8824 = vpop.f32.mrb[0].mxu0
  %v8825 = vadd.f32 0.0, %v8824
  %v8826 = vpop.f32.mrb[0].mxu0
  %8827 = vmatprep.mubr.f32.mxu0 0.0
  %8828 = vmatmul.mubr.f32.gmra.mrb[0].mxu0 %v8529
  %v8829 = vpop.f32.mrb[0].mxu0
  %v8830 = vadd.f32 0.0, %v8829
  %v8831 = vpop.f32.mrb[0].mxu0
  %8832 = vmatprep.mubr.f32.mxu0 0.0
  %8833 = vmatmul.mubr.f32.gmra.mrb[0].mxu0 %v8532
  %v8834 = vpop.f32.mrb[0].mxu0
  %v8835 = vadd.f32 0.0, %v8834
  %v8836 = vpop.f32.mrb[0].mxu0
  %8837 = vmatprep.mubr.f32.mxu0 0.0
  %8838 = vmatmul.mubr.f32.gmra.mrb[0].mxu0 %v8535
  %v8839 = vpop.f32.mrb[0].mxu0
  %v8840 = vadd.f32 0.0, %v8839
  %v8841 = vpop.f32.mrb[0].mxu0
  %8842 = vmatprep.mubr.f32.mxu0 0.0
  %8843 = vmatmul.mubr.f32.gmra.mrb[0].mxu0 %v8538
  %v8844 = vpop.f32.mrb[0].mxu0
  %v8845 = vadd.f32 0.0, %v8844
  %v8846 = vpop.f32.mrb[0].mxu0
  %8847 = vmatprep.mubr.f32.mxu0 0.0
  %8848 = vmatmul.mubr.f32.gmra.mrb[0].mxu0 %v8541
  %v8849 = vpop.f32.mrb[0].mxu0
  %v8850 = vadd.f32 0.0, %v8849
  %v8851 = vpop.f32.mrb[0].mxu0
  %8852 = vmatprep.mubr.f32.mxu0 0.0
  %8853 = vmatmul.mubr.f32.gmra.mrb[0].mxu0 %v8544
  %v8854 = vpop.f32.mrb[0].mxu0
  %v8855 = vadd.f32 0.0, %v8854
  %v8856 = vpop.f32.mrb[0].mxu0
  %8857 = vmatprep.mubr.f32.mxu0 0.0
  %8858 = vmatmul.mubr.f32.gmra.mrb[0].mxu0 %v8547
  %v8859 = vpop.f32.mrb[0].mxu0
  %v8860 = vadd.f32 0.0, %v8859
  %v8861 = vpop.f32.mrb[0].mxu0
  %8862 = vmatprep.mubr.f32.mxu0 0.0
  %8863 = vmatmul.mubr.f32.gmra.mrb[0].mxu0 %v8550
  %v8864 = vpop.f32.mrb[0].mxu0
  %v8865 = vadd.f32 0.0, %v8864
  %v8866 = vpop.f32.mrb[0].mxu0
  %8867 = vmatprep.mubr.f32.mxu0 0.0
  %8868 = vmatmul.mubr.f32.gmra.mrb[0].mxu0 %v8553
  %v8869 = vpop.f32.mrb[0].mxu0
  %v8870 = vadd.f32 0.0, %v8869
  %v8871 = vpop.f32.mrb[0].mxu0
  %8872 = vmatprep.mubr.f32.mxu0 0.0
  %8873 = vmatmul.mubr.f32.gmra.mrb[0].mxu0 %v8556
  %v8874 = vpop.f32.mrb[0].mxu0
  %v8875 = vadd.f32 0.0, %v8874
  %v8876 = vpop.f32.mrb[0].mxu0
  %8877 = vmatprep.mubr.f32.mxu0 0.0
  %8878 = vmatmul.mubr.f32.gmra.mrb[0].mxu0 %v8559
  %v8879 = vpop.f32.mrb[0].mxu0
  %v8880 = vadd.f32 0.0, %v8879
  %v8881 = vpop.f32.mrb[0].mxu0
  %8882 = vmatprep.mubr.f32.mxu0 0.0
  %8883 = vmatmul.mubr.f32.gmra.mrb[0].mxu0 %v8562
  %v8884 = vpop.f32.mrb[0].mxu0
  %v8885 = vadd.f32 0.0, %v8884
  %v8886 = vpop.f32.mrb[0].mxu0
  %8887 = vmatprep.mubr.f32.mxu0 0.0
  %8888 = vmatmul.mubr.f32.gmra.mrb[0].mxu0 %v8565
  %v8889 = vpop.f32.mrb[0].mxu0
  %v8890 = vadd.f32 0.0, %v8889
  %v8891 = vpop.f32.mrb[0].mxu0
  %8892 = vmatprep.mubr.f32.mxu0 0.0
  %8893 = vmatmul.mubr.f32.gmra.mrb[0].mxu0 %v8568
  %v8894 = vpop.f32.mrb[0].mxu0
  %v8895 = vadd.f32 0.0, %v8894
  %v8896 = vpop.f32.mrb[0].mxu0
  %8897 = vmatprep.mubr.f32.mxu0 0.0
  %8898 = vmatmul.mubr.f32.gmra.mrb[0].mxu0 %v8571
  %v8899 = vpop.f32.mrb[0].mxu0
  %v8900 = vadd.f32 0.0, %v8899
  %v8901 = vpop.f32.mrb[0].mxu0
  %8902 = vmatprep.mubr.f32.mxu0 0.0
  %8903 = vmatmul.mubr.f32.gmra.mrb[0].mxu0 %v8574
  %v8904 = vpop.f32.mrb[0].mxu0
  %v8905 = vadd.f32 0.0, %v8904
  %v8906 = vpop.f32.mrb[0].mxu0
  %8907 = vmatprep.mubr.f32.mxu0 0.0
  %8908 = vmatmul.mubr.f32.gmra.mrb[0].mxu0 %v8577
  %v8909 = vpop.f32.mrb[0].mxu0
  %v8910 = vadd.f32 0.0, %v8909
  %v8911 = vpop.f32.mrb[0].mxu0
  %8912 = vmatprep.mubr.f32.mxu0 0.0
  %8913 = vmatmul.mubr.f32.gmra.mrb[0].mxu0 %v8580
  %v8914 = vpop.f32.mrb[0].mxu0
  %v8915 = vadd.f32 0.0, %v8914
  %v8916 = vpop.f32.mrb[0].mxu0
  %8917 = vmatprep.mubr.f32.mxu0 0.0
  %8918 = vmatmul.mubr.f32.gmra.mrb[0].mxu0 %v8583
  %v8919 = vpop.f32.mrb[0].mxu0
  %v8920 = vadd.f32 0.0, %v8919
  %v8921 = vpop.f32.mrb[0].mxu0
  %8922 = vmatprep.mubr.f32.mxu0 0.0
  %8923 = vmatmul.mubr.f32.gmra.mrb[0].mxu0 %v8586
  %v8924 = vpop.f32.mrb[0].mxu0
  %v8925 = vadd.f32 0.0, %v8924
  %v8926 = vpop.f32.mrb[0].mxu0
  %8927 = vmatprep.mubr.f32.mxu0 0.0
  %8928 = vmatmul.mubr.f32.gmra.mrb[0].mxu0 %v8589
  %v8929 = vpop.f32.mrb[0].mxu0
  %v8930 = vadd.f32 0.0, %v8929
  %v8931 = vpop.f32.mrb[0].mxu0
  %8932 = vmatprep.mubr.f32.mxu0 0.0
  %8933 = vmatmul.mubr.f32.gmra.mrb[0].mxu0 %v8592
  %v8934 = vpop.f32.mrb[0].mxu0
  %v8935 = vadd.f32 0.0, %v8934
  %v8936 = vpop.f32.mrb[0].mxu0
  %8937 = vmatprep.mubr.f32.mxu0 0.0
  %8938 = vmatmul.mubr.f32.gmra.mrb[0].mxu0 %v8595
  %v8939 = vpop.f32.mrb[0].mxu0
  %v8940 = vadd.f32 0.0, %v8939
  %v8941 = vpop.f32.mrb[0].mxu0
  %8942 = vmatprep.mubr.f32.mxu0 0.0
  %8943 = vmatmul.mubr.f32.gmra.mrb[0].mxu0 %v8598
  %v8944 = vpop.f32.mrb[0].mxu0
  %v8945 = vadd.f32 0.0, %v8944
  %v8946 = vpop.f32.mrb[0].mxu0
  %8947 = vmatprep.mubr.f32.mxu0 0.0
  %8948 = vmatmul.mubr.f32.gmra.mrb[0].mxu0 %v8601
  %v8949 = vpop.f32.mrb[0].mxu0
  %v8950 = vadd.f32 0.0, %v8949
  %v8951 = vpop.f32.mrb[0].mxu0
  %8952 = vmatprep.mubr.f32.mxu0 0.0
  %8953 = vmatmul.mubr.f32.gmra.mrb[0].mxu0 %v8604
  %v8954 = vpop.f32.mrb[0].mxu0
  %v8955 = vadd.f32 0.0, %v8954
  %v8956 = vpop.f32.mrb[0].mxu0
  %8957 = vmatprep.mubr.f32.mxu0 0.0
  %8958 = vmatmul.mubr.f32.gmra.mrb[0].mxu0 %v8607
  %v8959 = vpop.f32.mrb[0].mxu0
  %v8960 = vadd.f32 0.0, %v8959
  %v8961 = vpop.f32.mrb[0].mxu0
  %8962 = vmatprep.mubr.f32.mxu0 0.0
  %8963 = vmatmul.mubr.f32.gmra.mrb[0].mxu0 %v8610
  %v8964 = vpop.f32.mrb[0].mxu0
  %v8965 = vadd.f32 0.0, %v8964
  %v8966 = vpop.f32.mrb[0].mxu0
  %8967 = vmatprep.mubr.f32.mxu0 0.0
  %8968 = vmatmul.mubr.f32.gmra.mrb[0].mxu0 %v8613
  %v8969 = vpop.f32.mrb[0].mxu0
  %v8970 = vadd.f32 0.0, %v8969
  %v8971 = vpop.f32.mrb[0].mxu0
  %8972 = vmatprep.mubr.f32.mxu0 0.0
  %8973 = vmatmul.mubr.f32.gmra.mrb[0].mxu0 %v8616
  %v8974 = vpop.f32.mrb[0].mxu0
  %v8975 = vadd.f32 0.0, %v8974
  %v8976 = vpop.f32.mrb[0].mxu0
  %8977 = vmatprep.mubr.f32.mxu0 0.0
  %8978 = vmatmul.mubr.f32.gmra.mrb[0].mxu0 %v8619
  %v8979 = vpop.f32.mrb[0].mxu0
  %v8980 = vadd.f32 0.0, %v8979
  %v8981 = vpop.f32.mrb[0].mxu0
  %8982 = vmatprep.mubr.f32.mxu0 0.0
  %8983 = vmatmul.mubr.f32.gmra.mrb[0].mxu0 %v8622
  %v8984 = vpop.f32.mrb[0].mxu0
  %v8985 = vadd.f32 0.0, %v8984
  %v8986 = vpop.f32.mrb[0].mxu0
  %8987 = vmatprep.mubr.f32.mxu0 0.0
  %8988 = vmatmul.mubr.f32.gmra.mrb[0].mxu0 %v8625
  %v8989 = vpop.f32.mrb[0].mxu0
  %v8990 = vadd.f32 0.0, %v8989
  %v8991 = vpop.f32.mrb[0].mxu0
  %8992 = vmatprep.mubr.f32.mxu0 0.0
  %8993 = vmatmul.mubr.f32.gmra.mrb[0].mxu0 %v8628
  %v8994 = vpop.f32.mrb[0].mxu0
  %v8995 = vadd.f32 0.0, %v8994
  %v8996 = vpop.f32.mrb[0].mxu0
  %8997 = vmatprep.mubr.f32.mxu0 0.0
  %8998 = vmatmul.mubr.f32.gmra.mrb[0].mxu0 %v8631
  %v8999 = vpop.f32.mrb[0].mxu0
  %v9000 = vadd.f32 0.0, %v8999
  %v9001 = vpop.f32.mrb[0].mxu0
  %9002 = vmatprep.mubr.f32.mxu0 0.0
  %9003 = vmatmul.mubr.f32.gmra.mrb[0].mxu0 %v8634
  %v9004 = vpop.f32.mrb[0].mxu0
  %v9005 = vadd.f32 0.0, %v9004
  %v9006 = vpop.f32.mrb[0].mxu0
  %9007 = vmatprep.mubr.f32.mxu0 0.0
  %9008 = vmatmul.mubr.f32.gmra.mrb[0].mxu0 %v8637
  %v9009 = vpop.f32.mrb[0].mxu0
  %v9010 = vadd.f32 0.0, %v9009
  %v9011 = vpop.f32.mrb[0].mxu0
  %9012 = vmatprep.mubr.f32.mxu0 0.0
  %9013 = vmatmul.mubr.f32.gmra.mrb[0].mxu0 %v8640
  %v9014 = vpop.f32.mrb[0].mxu0
  %v9015 = vadd.f32 0.0, %v9014
  %v9016 = vpop.f32.mrb[0].mxu0
  %9017 = vmatprep.mubr.f32.mxu0 0.0
  %9018 = vmatmul.mubr.f32.gmra.mrb[0].mxu0 %v8643
  %v9019 = vpop.f32.mrb[0].mxu0
  %v9020 = vadd.f32 0.0, %v9019
  %v9021 = vpop.f32.mrb[0].mxu0
  %9022 = vmatprep.mubr.f32.mxu0 0.0
  %9023 = vmatmul.mubr.f32.gmra.mrb[0].mxu0 %v8646
  %v9024 = vpop.f32.mrb[0].mxu0
  %v9025 = vadd.f32 0.0, %v9024
  %v9026 = vpop.f32.mrb[0].mxu0
  %9027 = vmatprep.mubr.f32.mxu0 0.0
  %9028 = vmatmul.mubr.f32.gmra.mrb[0].mxu0 %v8649
  %v9029 = vpop.f32.mrb[0].mxu0
  %v9030 = vadd.f32 0.0, %v9029
  %v9031 = vpop.f32.mrb[0].mxu0
  %9032 = vmatprep.mubr.f32.mxu0 0.0
  %9033 = vmatmul.mubr.f32.gmra.mrb[0].mxu0 %v8652
  %v9034 = vpop.f32.mrb[0].mxu0
  %v9035 = vadd.f32 0.0, %v9034
  %v9036 = vpop.f32.mrb[0].mxu0
  %9037 = vmatprep.mubr.f32.mxu0 0.0
  %9038 = vmatmul.mubr.f32.gmra.mrb[0].mxu0 %v8655
  %v9039 = vpop.f32.mrb[0].mxu0
  %v9040 = vadd.f32 0.0, %v9039
  %v9041 = vpop.f32.mrb[0].mxu0
  %9042 = vmatprep.mubr.f32.mxu0 0.0
  %9043 = vmatmul.mubr.f32.gmra.mrb[0].mxu0 %v8658
  %v9044 = vpop.f32.mrb[0].mxu0
  %v9045 = vadd.f32 0.0, %v9044
  %v9046 = vpop.f32.mrb[0].mxu0
  %9047 = vdwg.mxu0
  %v9048 = vadd.f32 %v8086, %v8730
  %v9049 = vadd.f32 %v8091, %v8735
  %v9050 = vadd.f32 %v8096, %v8740
  %v9051 = vadd.f32 %v8101, %v8745
  %v9052 = vadd.f32 %v8106, %v8750
  %v9053 = vadd.f32 %v8111, %v8755
  %v9054 = vadd.f32 %v8116, %v8760
  %v9055 = vadd.f32 %v8121, %v8765
  %v9056 = vadd.f32 %v8126, %v8770
  %v9057 = vadd.f32 %v8131, %v8775
  %v9058 = vadd.f32 %v8136, %v8780
  %v9059 = vadd.f32 %v8141, %v8785
  %v9060 = vadd.f32 %v8146, %v8790
  %v9061 = vadd.f32 %v8151, %v8795
  %v9062 = vadd.f32 %v8156, %v8800
  %v9063 = vadd.f32 %v8161, %v8805
  %v9064 = vadd.f32 %v8166, %v8810
  %v9065 = vadd.f32 %v8171, %v8815
  %v9066 = vadd.f32 %v8176, %v8820
  %v9067 = vadd.f32 %v8181, %v8825
  %v9068 = vadd.f32 %v8186, %v8830
  %v9069 = vadd.f32 %v8191, %v8835
  %v9070 = vadd.f32 %v8196, %v8840
  %v9071 = vadd.f32 %v8201, %v8845
  %v9072 = vadd.f32 %v8206, %v8850
  %v9073 = vadd.f32 %v8211, %v8855
  %v9074 = vadd.f32 %v8216, %v8860
  %v9075 = vadd.f32 %v8221, %v8865
  %v9076 = vadd.f32 %v8226, %v8870
  %v9077 = vadd.f32 %v8231, %v8875
  %v9078 = vadd.f32 %v8236, %v8880
  %v9079 = vadd.f32 %v8241, %v8885
  %v9080 = vadd.f32 %v8246, %v8890
  %v9081 = vadd.f32 %v8251, %v8895
  %v9082 = vadd.f32 %v8256, %v8900
  %v9083 = vadd.f32 %v8261, %v8905
  %v9084 = vadd.f32 %v8266, %v8910
  %v9085 = vadd.f32 %v8271, %v8915
  %v9086 = vadd.f32 %v8276, %v8920
  %v9087 = vadd.f32 %v8281, %v8925
  %v9088 = vadd.f32 %v8286, %v8930
  %v9089 = vadd.f32 %v8291, %v8935
  %v9090 = vadd.f32 %v8296, %v8940
  %v9091 = vadd.f32 %v8301, %v8945
  %v9092 = vadd.f32 %v8306, %v8950
  %v9093 = vadd.f32 %v8311, %v8955
  %v9094 = vadd.f32 %v8316, %v8960
  %v9095 = vadd.f32 %v8321, %v8965
  %v9096 = vadd.f32 %v8326, %v8970
  %v9097 = vadd.f32 %v8331, %v8975
  %v9098 = vadd.f32 %v8336, %v8980
  %v9099 = vadd.f32 %v8341, %v8985
  %v9100 = vadd.f32 %v8346, %v8990
  %v9101 = vadd.f32 %v8351, %v8995
  %v9102 = vadd.f32 %v8356, %v9000
  %v9103 = vadd.f32 %v8361, %v9005
  %v9104 = vadd.f32 %v8366, %v9010
  %v9105 = vadd.f32 %v8371, %v9015
  %v9106 = vadd.f32 %v8376, %v9020
  %v9107 = vadd.f32 %v8381, %v9025
  %v9108 = vadd.f32 %v8386, %v9030
  %v9109 = vadd.f32 %v8391, %v9035
  %v9110 = vadd.f32 %v8396, %v9040
  %v9111 = vadd.f32 %v8401, %v9045
  %v9112 = vld [vmem:[%s196] sm:$0xff]
  %v9113 = vld [vmem:[%s196 + $0x8] sm:$0xff]
  %v9114 = vld [vmem:[%s196 + $0x18] sm:$0xff]
  %v9115 = vld [vmem:[%s196 + $0x20] sm:$0xff]
  %v9116 = vld [vmem:[%s196 + $0x30] sm:$0xff]
  %v9117 = vld [vmem:[%s196 + $0x38] sm:$0xff]
  %v9118 = vld [vmem:[%s196 + $0x48] sm:$0xff]
  %v9119 = vld [vmem:[%s196 + $0x50] sm:$0xff]
  %v9120 = vld [vmem:[%s196 + $0x60] sm:$0xff]
  %v9121 = vld [vmem:[%s196 + $0x68] sm:$0xff]
  %v9122 = vld [vmem:[%s196 + $0x78] sm:$0xff]
  %v9123 = vld [vmem:[%s196 + $0x80] sm:$0xff]
  %v9124 = vld [vmem:[%s196 + $0x90] sm:$0xff]
  %v9125 = vld [vmem:[%s196 + $0x98] sm:$0xff]
  %v9126 = vld [vmem:[%s196 + $0xa8] sm:$0xff]
  %v9127 = vld [vmem:[%s196 + $0xb0] sm:$0xff]
  %v9128 = vld [vmem:[%s196 + $0xc0] sm:$0xff]
  %v9129 = vld [vmem:[%s196 + $0xc8] sm:$0xff]
  %v9130 = vld [vmem:[%s196 + $0xd8] sm:$0xff]
  %v9131 = vld [vmem:[%s196 + $0xe0] sm:$0xff]
  %v9132 = vld [vmem:[%s196 + $0xf0] sm:$0xff]
  %v9133 = vld [vmem:[%s196 + $0xf8] sm:$0xff]
  %v9134 = vld [vmem:[%s196 + $0x108] sm:$0xff]
  %v9135 = vld [vmem:[%s196 + $0x110] sm:$0xff]
  %v9136 = vld [vmem:[%s196 + $0x120] sm:$0xff]
  %v9137 = vld [vmem:[%s196 + $0x128] sm:$0xff]
  %v9138 = vld [vmem:[%s196 + $0x138] sm:$0xff]
  %v9139 = vld [vmem:[%s196 + $0x140] sm:$0xff]
  %v9140 = vld [vmem:[%s196 + $0x150] sm:$0xff]
  %v9141 = vld [vmem:[%s196 + $0x158] sm:$0xff]
  %v9142 = vld [vmem:[%s196 + $0x168] sm:$0xff]
  %v9143 = vld [vmem:[%s196 + $0x170] sm:$0xff]
  %v9144 = vld [vmem:[%s196 + $0x1b0] sm:$0xff]
  %v9145 = vld [vmem:[%s196 + $0x1b8] sm:$0xff]
  %v9146 = vld [vmem:[%s196 + $0x1c8] sm:$0xff]
  %v9147 = vld [vmem:[%s196 + $0x1d0] sm:$0xff]
  %v9148 = vld [vmem:[%s196 + $0x1e0] sm:$0xff]
  %v9149 = vld [vmem:[%s196 + $0x1e8] sm:$0xff]
  %v9150 = vld [vmem:[%s196 + $0x1f8] sm:$0xff]
  %v9151 = vld [vmem:[%s196 + $0x200] sm:$0xff]
  %v9152 = vld [vmem:[%s196 + $0x210] sm:$0xff]
  %v9153 = vld [vmem:[%s196 + $0x218] sm:$0xff]
  %v9154 = vld [vmem:[%s196 + $0x228] sm:$0xff]
  %v9155 = vld [vmem:[%s196 + $0x230] sm:$0xff]
  %v9156 = vld [vmem:[%s196 + $0x240] sm:$0xff]
  %v9157 = vld [vmem:[%s196 + $0x248] sm:$0xff]
  %v9158 = vld [vmem:[%s196 + $0x258] sm:$0xff]
  %v9159 = vld [vmem:[%s196 + $0x260] sm:$0xff]
  %v9160 = vld [vmem:[%s196 + $0x270] sm:$0xff]
  %v9161 = vld [vmem:[%s196 + $0x278] sm:$0xff]
  %v9162 = vld [vmem:[%s196 + $0x288] sm:$0xff]
  %v9163 = vld [vmem:[%s196 + $0x290] sm:$0xff]
  %v9164 = vld [vmem:[%s196 + $0x2a0] sm:$0xff]
  %v9165 = vld [vmem:[%s196 + $0x2a8] sm:$0xff]
  %v9166 = vld [vmem:[%s196 + $0x2b8] sm:$0xff]
  %v9167 = vld [vmem:[%s196 + $0x2c0] sm:$0xff]
  %v9168 = vld [vmem:[%s196 + $0x2d0] sm:$0xff]
  %v9169 = vld [vmem:[%s196 + $0x2d8] sm:$0xff]
  %v9170 = vld [vmem:[%s196 + $0x2e8] sm:$0xff]
  %v9171 = vld [vmem:[%s196 + $0x2f0] sm:$0xff]
  %v9172 = vld [vmem:[%s196 + $0x300] sm:$0xff]
  %v9173 = vld [vmem:[%s196 + $0x308] sm:$0xff]
  %v9174 = vld [vmem:[%s196 + $0x318] sm:$0xff]
  %v9175 = vld [vmem:[%s196 + $0x320] sm:$0xff]
  %v9177 = vsel %vm44, %v9112, 0
  %v9180 = vsel %vm44, %v9113, 0
  %v9183 = vsel %vm44, %v9114, 0
  %v9186 = vsel %vm44, %v9115, 0
  %v9189 = vsel %vm44, %v9116, 0
  %v9192 = vsel %vm44, %v9117, 0
  %v9195 = vsel %vm44, %v9118, 0
  %v9198 = vsel %vm44, %v9119, 0
  %v9201 = vsel %vm44, %v9120, 0
  %v9204 = vsel %vm44, %v9121, 0
  %v9207 = vsel %vm44, %v9122, 0
  %v9210 = vsel %vm44, %v9123, 0
  %v9213 = vsel %vm44, %v9124, 0
  %v9216 = vsel %vm44, %v9125, 0
  %v9219 = vsel %vm44, %v9126, 0
  %v9222 = vsel %vm44, %v9127, 0
  %v9225 = vsel %vm44, %v9128, 0
  %v9228 = vsel %vm44, %v9129, 0
  %v9231 = vsel %vm44, %v9130, 0
  %v9234 = vsel %vm44, %v9131, 0
  %v9237 = vsel %vm44, %v9132, 0
  %v9240 = vsel %vm44, %v9133, 0
  %v9243 = vsel %vm44, %v9134, 0
  %v9246 = vsel %vm44, %v9135, 0
  %v9249 = vsel %vm44, %v9136, 0
  %v9252 = vsel %vm44, %v9137, 0
  %v9255 = vsel %vm44, %v9138, 0
  %v9258 = vsel %vm44, %v9139, 0
  %v9261 = vsel %vm44, %v9140, 0
  %v9264 = vsel %vm44, %v9141, 0
  %v9267 = vsel %vm44, %v9142, 0
  %v9270 = vsel %vm44, %v9143, 0
  %v9273 = vsel %vm44, %v9144, 0
  %v9276 = vsel %vm44, %v9145, 0
  %v9279 = vsel %vm44, %v9146, 0
  %v9282 = vsel %vm44, %v9147, 0
  %v9285 = vsel %vm44, %v9148, 0
  %v9288 = vsel %vm44, %v9149, 0
  %v9291 = vsel %vm44, %v9150, 0
  %v9294 = vsel %vm44, %v9151, 0
  %v9297 = vsel %vm44, %v9152, 0
  %v9300 = vsel %vm44, %v9153, 0
  %v9303 = vsel %vm44, %v9154, 0
  %v9306 = vsel %vm44, %v9155, 0
  %v9309 = vsel %vm44, %v9156, 0
  %v9312 = vsel %vm44, %v9157, 0
  %v9315 = vsel %vm44, %v9158, 0
  %v9318 = vsel %vm44, %v9159, 0
  %v9321 = vsel %vm44, %v9160, 0
  %v9324 = vsel %vm44, %v9161, 0
  %v9327 = vsel %vm44, %v9162, 0
  %v9330 = vsel %vm44, %v9163, 0
  %v9333 = vsel %vm44, %v9164, 0
  %v9336 = vsel %vm44, %v9165, 0
  %v9339 = vsel %vm44, %v9166, 0
  %v9342 = vsel %vm44, %v9167, 0
  %v9345 = vsel %vm44, %v9168, 0
  %v9348 = vsel %vm44, %v9169, 0
  %v9351 = vsel %vm44, %v9170, 0
  %v9354 = vsel %vm44, %v9171, 0
  %v9357 = vsel %vm44, %v9172, 0
  %v9360 = vsel %vm44, %v9173, 0
  %v9363 = vsel %vm44, %v9174, 0
  %v9366 = vsel %vm44, %v9175, 0
  %v9369 = vsel %vm581, %v38, 0
  %9371 = vmatprep.subr.mxu0 0.0
  %9372 = vmatpush1.msra.mxu0 %v9369
  %9373 = vmatprep.subr.mxu0 0.0
  %9374 = vmatpush1.msra.mxu0 0.0
  %9375 = vmatprep.subr.mxu0 0.0
  %9376 = vmatpush1.msra.mxu0 0.0
  %9377 = vmatprep.subr.mxu0 0.0
  %9378 = vmatpush1.msra.mxu0 0.0
  %9379 = vmatprep.subr.mxu0 0.0
  %9380 = vmatpush1.msra.mxu0 0.0
  %9381 = vmatprep.subr.mxu0 0.0
  %9382 = vmatpush1.msra.mxu0 0.0
  %9383 = vmatprep.subr.mxu0 0.0
  %9384 = vmatpush1.msra.mxu0 0.0
  %9385 = vmatprep.subr.mxu0 0.0
  %9386 = vmatpush1.msra.mxu0 0.0
  %9387 = vmatprep.subr.mxu0 0.0
  %9388 = vmatpush1.msra.mxu0 0.0
  %9389 = vmatprep.subr.mxu0 0.0
  %9390 = vmatpush1.msra.mxu0 0.0
  %9391 = vmatprep.subr.mxu0 0.0
  %9392 = vmatpush1.msra.mxu0 0.0
  %9393 = vmatprep.subr.mxu0 0.0
  %9394 = vmatpush1.msra.mxu0 0.0
  %9395 = vmatprep.subr.mxu0 0.0
  %9396 = vmatpush1.msra.mxu0 0.0
  %9397 = vmatprep.subr.mxu0 0.0
  %9398 = vmatpush1.msra.mxu0 0.0
  %9399 = vmatprep.subr.mxu0 0.0
  %9400 = vmatpush1.msra.mxu0 0.0
  %9401 = vmatprep.subr.mxu0 0.0
  %9402 = vmatpush1.msra.mxu0 0.0
  %9403 = vmatprep.subr.mxu0 0.0
  %9404 = vmatpush1.msra.mxu0 0.0
  %9405 = vmatprep.subr.mxu0 0.0
  %9406 = vmatpush1.msra.mxu0 0.0
  %9407 = vmatprep.subr.mxu0 0.0
  %9408 = vmatpush1.msra.mxu0 0.0
  %9409 = vmatprep.subr.mxu0 0.0
  %9410 = vmatpush1.msra.mxu0 0.0
  %9411 = vmatprep.subr.mxu0 0.0
  %9412 = vmatpush1.msra.mxu0 0.0
  %9413 = vmatprep.subr.mxu0 0.0
  %9414 = vmatpush1.msra.mxu0 0.0
  %9415 = vmatprep.subr.mxu0 0.0
  %9416 = vmatpush1.msra.mxu0 0.0
  %9417 = vmatprep.subr.mxu0 0.0
  %9418 = vmatpush1.msra.mxu0 0.0
  %9419 = vmatprep.subr.mxu0 0.0
  %9420 = vmatpush1.msra.mxu0 0.0
  %9421 = vmatprep.subr.mxu0 0.0
  %9422 = vmatpush1.msra.mxu0 0.0
  %9423 = vmatprep.subr.mxu0 0.0
  %9424 = vmatpush1.msra.mxu0 0.0
  %9425 = vmatprep.subr.mxu0 0.0
  %9426 = vmatpush1.msra.mxu0 0.0
  %9427 = vmatprep.subr.mxu0 0.0
  %9428 = vmatpush1.msra.mxu0 0.0
  %9429 = vmatprep.subr.mxu0 0.0
  %9430 = vmatpush1.msra.mxu0 0.0
  %9431 = vmatprep.subr.mxu0 0.0
  %9432 = vmatpush1.msra.mxu0 0.0
  %9433 = vmatprep.subr.mxu0 0.0
  %9434 = vmatpush1.msra.mxu0 0.0
  %9435 = vmatprep.mubr.f32.mxu0 0.0
  %9436 = vmatmul.mubr.f32.gmra.mrb[0].mxu0 %v9177
  %v9437 = vpop.f32.mrb[0].mxu0
  %v9438 = vadd.f32 0.0, %v9437
  %v9439 = vpop.f32.mrb[0].mxu0
  %9440 = vmatprep.mubr.f32.mxu0 0.0
  %9441 = vmatmul.mubr.f32.gmra.mrb[0].mxu0 %v9180
  %v9442 = vpop.f32.mrb[0].mxu0
  %v9443 = vadd.f32 0.0, %v9442
  %v9444 = vpop.f32.mrb[0].mxu0
  %9445 = vmatprep.mubr.f32.mxu0 0.0
  %9446 = vmatmul.mubr.f32.gmra.mrb[0].mxu0 %v9183
  %v9447 = vpop.f32.mrb[0].mxu0
  %v9448 = vadd.f32 0.0, %v9447
  %v9449 = vpop.f32.mrb[0].mxu0
  %9450 = vmatprep.mubr.f32.mxu0 0.0
  %9451 = vmatmul.mubr.f32.gmra.mrb[0].mxu0 %v9186
  %v9452 = vpop.f32.mrb[0].mxu0
  %v9453 = vadd.f32 0.0, %v9452
  %v9454 = vpop.f32.mrb[0].mxu0
  %9455 = vmatprep.mubr.f32.mxu0 0.0
  %9456 = vmatmul.mubr.f32.gmra.mrb[0].mxu0 %v9189
  %v9457 = vpop.f32.mrb[0].mxu0
  %v9458 = vadd.f32 0.0, %v9457
  %v9459 = vpop.f32.mrb[0].mxu0
  %9460 = vmatprep.mubr.f32.mxu0 0.0
  %9461 = vmatmul.mubr.f32.gmra.mrb[0].mxu0 %v9192
  %v9462 = vpop.f32.mrb[0].mxu0
  %v9463 = vadd.f32 0.0, %v9462
  %v9464 = vpop.f32.mrb[0].mxu0
  %9465 = vmatprep.mubr.f32.mxu0 0.0
  %9466 = vmatmul.mubr.f32.gmra.mrb[0].mxu0 %v9195
  %v9467 = vpop.f32.mrb[0].mxu0
  %v9468 = vadd.f32 0.0, %v9467
  %v9469 = vpop.f32.mrb[0].mxu0
  %9470 = vmatprep.mubr.f32.mxu0 0.0
  %9471 = vmatmul.mubr.f32.gmra.mrb[0].mxu0 %v9198
  %v9472 = vpop.f32.mrb[0].mxu0
  %v9473 = vadd.f32 0.0, %v9472
  %v9474 = vpop.f32.mrb[0].mxu0
  %9475 = vmatprep.mubr.f32.mxu0 0.0
  %9476 = vmatmul.mubr.f32.gmra.mrb[0].mxu0 %v9201
  %v9477 = vpop.f32.mrb[0].mxu0
  %v9478 = vadd.f32 0.0, %v9477
  %v9479 = vpop.f32.mrb[0].mxu0
  %9480 = vmatprep.mubr.f32.mxu0 0.0
  %9481 = vmatmul.mubr.f32.gmra.mrb[0].mxu0 %v9204
  %v9482 = vpop.f32.mrb[0].mxu0
  %v9483 = vadd.f32 0.0, %v9482
  %v9484 = vpop.f32.mrb[0].mxu0
  %9485 = vmatprep.mubr.f32.mxu0 0.0
  %9486 = vmatmul.mubr.f32.gmra.mrb[0].mxu0 %v9207
  %v9487 = vpop.f32.mrb[0].mxu0
  %v9488 = vadd.f32 0.0, %v9487
  %v9489 = vpop.f32.mrb[0].mxu0
  %9490 = vmatprep.mubr.f32.mxu0 0.0
  %9491 = vmatmul.mubr.f32.gmra.mrb[0].mxu0 %v9210
  %v9492 = vpop.f32.mrb[0].mxu0
  %v9493 = vadd.f32 0.0, %v9492
  %v9494 = vpop.f32.mrb[0].mxu0
  %9495 = vmatprep.mubr.f32.mxu0 0.0
  %9496 = vmatmul.mubr.f32.gmra.mrb[0].mxu0 %v9213
  %v9497 = vpop.f32.mrb[0].mxu0
  %v9498 = vadd.f32 0.0, %v9497
  %v9499 = vpop.f32.mrb[0].mxu0
  %9500 = vmatprep.mubr.f32.mxu0 0.0
  %9501 = vmatmul.mubr.f32.gmra.mrb[0].mxu0 %v9216
  %v9502 = vpop.f32.mrb[0].mxu0
  %v9503 = vadd.f32 0.0, %v9502
  %v9504 = vpop.f32.mrb[0].mxu0
  %9505 = vmatprep.mubr.f32.mxu0 0.0
  %9506 = vmatmul.mubr.f32.gmra.mrb[0].mxu0 %v9219
  %v9507 = vpop.f32.mrb[0].mxu0
  %v9508 = vadd.f32 0.0, %v9507
  %v9509 = vpop.f32.mrb[0].mxu0
  %9510 = vmatprep.mubr.f32.mxu0 0.0
  %9511 = vmatmul.mubr.f32.gmra.mrb[0].mxu0 %v9222
  %v9512 = vpop.f32.mrb[0].mxu0
  %v9513 = vadd.f32 0.0, %v9512
  %v9514 = vpop.f32.mrb[0].mxu0
  %9515 = vmatprep.mubr.f32.mxu0 0.0
  %9516 = vmatmul.mubr.f32.gmra.mrb[0].mxu0 %v9225
  %v9517 = vpop.f32.mrb[0].mxu0
  %v9518 = vadd.f32 0.0, %v9517
  %v9519 = vpop.f32.mrb[0].mxu0
  %9520 = vmatprep.mubr.f32.mxu0 0.0
  %9521 = vmatmul.mubr.f32.gmra.mrb[0].mxu0 %v9228
  %v9522 = vpop.f32.mrb[0].mxu0
  %v9523 = vadd.f32 0.0, %v9522
  %v9524 = vpop.f32.mrb[0].mxu0
  %9525 = vmatprep.mubr.f32.mxu0 0.0
  %9526 = vmatmul.mubr.f32.gmra.mrb[0].mxu0 %v9231
  %v9527 = vpop.f32.mrb[0].mxu0
  %v9528 = vadd.f32 0.0, %v9527
  %v9529 = vpop.f32.mrb[0].mxu0
  %9530 = vmatprep.mubr.f32.mxu0 0.0
  %9531 = vmatmul.mubr.f32.gmra.mrb[0].mxu0 %v9234
  %v9532 = vpop.f32.mrb[0].mxu0
  %v9533 = vadd.f32 0.0, %v9532
  %v9534 = vpop.f32.mrb[0].mxu0
  %9535 = vmatprep.mubr.f32.mxu0 0.0
  %9536 = vmatmul.mubr.f32.gmra.mrb[0].mxu0 %v9237
  %v9537 = vpop.f32.mrb[0].mxu0
  %v9538 = vadd.f32 0.0, %v9537
  %v9539 = vpop.f32.mrb[0].mxu0
  %9540 = vmatprep.mubr.f32.mxu0 0.0
  %9541 = vmatmul.mubr.f32.gmra.mrb[0].mxu0 %v9240
  %v9542 = vpop.f32.mrb[0].mxu0
  %v9543 = vadd.f32 0.0, %v9542
  %v9544 = vpop.f32.mrb[0].mxu0
  %9545 = vmatprep.mubr.f32.mxu0 0.0
  %9546 = vmatmul.mubr.f32.gmra.mrb[0].mxu0 %v9243
  %v9547 = vpop.f32.mrb[0].mxu0
  %v9548 = vadd.f32 0.0, %v9547
  %v9549 = vpop.f32.mrb[0].mxu0
  %9550 = vmatprep.mubr.f32.mxu0 0.0
  %9551 = vmatmul.mubr.f32.gmra.mrb[0].mxu0 %v9246
  %v9552 = vpop.f32.mrb[0].mxu0
  %v9553 = vadd.f32 0.0, %v9552
  %v9554 = vpop.f32.mrb[0].mxu0
  %9555 = vmatprep.mubr.f32.mxu0 0.0
  %9556 = vmatmul.mubr.f32.gmra.mrb[0].mxu0 %v9249
  %v9557 = vpop.f32.mrb[0].mxu0
  %v9558 = vadd.f32 0.0, %v9557
  %v9559 = vpop.f32.mrb[0].mxu0
  %9560 = vmatprep.mubr.f32.mxu0 0.0
  %9561 = vmatmul.mubr.f32.gmra.mrb[0].mxu0 %v9252
  %v9562 = vpop.f32.mrb[0].mxu0
  %v9563 = vadd.f32 0.0, %v9562
  %v9564 = vpop.f32.mrb[0].mxu0
  %9565 = vmatprep.mubr.f32.mxu0 0.0
  %9566 = vmatmul.mubr.f32.gmra.mrb[0].mxu0 %v9255
  %v9567 = vpop.f32.mrb[0].mxu0
  %v9568 = vadd.f32 0.0, %v9567
  %v9569 = vpop.f32.mrb[0].mxu0
  %9570 = vmatprep.mubr.f32.mxu0 0.0
  %9571 = vmatmul.mubr.f32.gmra.mrb[0].mxu0 %v9258
  %v9572 = vpop.f32.mrb[0].mxu0
  %v9573 = vadd.f32 0.0, %v9572
  %v9574 = vpop.f32.mrb[0].mxu0
  %9575 = vmatprep.mubr.f32.mxu0 0.0
  %9576 = vmatmul.mubr.f32.gmra.mrb[0].mxu0 %v9261
  %v9577 = vpop.f32.mrb[0].mxu0
  %v9578 = vadd.f32 0.0, %v9577
  %v9579 = vpop.f32.mrb[0].mxu0
  %9580 = vmatprep.mubr.f32.mxu0 0.0
  %9581 = vmatmul.mubr.f32.gmra.mrb[0].mxu0 %v9264
  %v9582 = vpop.f32.mrb[0].mxu0
  %v9583 = vadd.f32 0.0, %v9582
  %v9584 = vpop.f32.mrb[0].mxu0
  %9585 = vmatprep.mubr.f32.mxu0 0.0
  %9586 = vmatmul.mubr.f32.gmra.mrb[0].mxu0 %v9267
  %v9587 = vpop.f32.mrb[0].mxu0
  %v9588 = vadd.f32 0.0, %v9587
  %v9589 = vpop.f32.mrb[0].mxu0
  %9590 = vmatprep.mubr.f32.mxu0 0.0
  %9591 = vmatmul.mubr.f32.gmra.mrb[0].mxu0 %v9270
  %v9592 = vpop.f32.mrb[0].mxu0
  %v9593 = vadd.f32 0.0, %v9592
  %v9594 = vpop.f32.mrb[0].mxu0
  %9595 = vmatprep.mubr.f32.mxu0 0.0
  %9596 = vmatmul.mubr.f32.gmra.mrb[0].mxu0 %v9273
  %v9597 = vpop.f32.mrb[0].mxu0
  %v9598 = vadd.f32 0.0, %v9597
  %v9599 = vpop.f32.mrb[0].mxu0
  %9600 = vmatprep.mubr.f32.mxu0 0.0
  %9601 = vmatmul.mubr.f32.gmra.mrb[0].mxu0 %v9276
  %v9602 = vpop.f32.mrb[0].mxu0
  %v9603 = vadd.f32 0.0, %v9602
  %v9604 = vpop.f32.mrb[0].mxu0
  %9605 = vmatprep.mubr.f32.mxu0 0.0
  %9606 = vmatmul.mubr.f32.gmra.mrb[0].mxu0 %v9279
  %v9607 = vpop.f32.mrb[0].mxu0
  %v9608 = vadd.f32 0.0, %v9607
  %v9609 = vpop.f32.mrb[0].mxu0
  %9610 = vmatprep.mubr.f32.mxu0 0.0
  %9611 = vmatmul.mubr.f32.gmra.mrb[0].mxu0 %v9282
  %v9612 = vpop.f32.mrb[0].mxu0
  %v9613 = vadd.f32 0.0, %v9612
  %v9614 = vpop.f32.mrb[0].mxu0
  %9615 = vmatprep.mubr.f32.mxu0 0.0
  %9616 = vmatmul.mubr.f32.gmra.mrb[0].mxu0 %v9285
  %v9617 = vpop.f32.mrb[0].mxu0
  %v9618 = vadd.f32 0.0, %v9617
  %v9619 = vpop.f32.mrb[0].mxu0
  %9620 = vmatprep.mubr.f32.mxu0 0.0
  %9621 = vmatmul.mubr.f32.gmra.mrb[0].mxu0 %v9288
  %v9622 = vpop.f32.mrb[0].mxu0
  %v9623 = vadd.f32 0.0, %v9622
  %v9624 = vpop.f32.mrb[0].mxu0
  %9625 = vmatprep.mubr.f32.mxu0 0.0
  %9626 = vmatmul.mubr.f32.gmra.mrb[0].mxu0 %v9291
  %v9627 = vpop.f32.mrb[0].mxu0
  %v9628 = vadd.f32 0.0, %v9627
  %v9629 = vpop.f32.mrb[0].mxu0
  %9630 = vmatprep.mubr.f32.mxu0 0.0
  %9631 = vmatmul.mubr.f32.gmra.mrb[0].mxu0 %v9294
  %v9632 = vpop.f32.mrb[0].mxu0
  %v9633 = vadd.f32 0.0, %v9632
  %v9634 = vpop.f32.mrb[0].mxu0
  %9635 = vmatprep.mubr.f32.mxu0 0.0
  %9636 = vmatmul.mubr.f32.gmra.mrb[0].mxu0 %v9297
  %v9637 = vpop.f32.mrb[0].mxu0
  %v9638 = vadd.f32 0.0, %v9637
  %v9639 = vpop.f32.mrb[0].mxu0
  %9640 = vmatprep.mubr.f32.mxu0 0.0
  %9641 = vmatmul.mubr.f32.gmra.mrb[0].mxu0 %v9300
  %v9642 = vpop.f32.mrb[0].mxu0
  %v9643 = vadd.f32 0.0, %v9642
  %v9644 = vpop.f32.mrb[0].mxu0
  %9645 = vmatprep.mubr.f32.mxu0 0.0
  %9646 = vmatmul.mubr.f32.gmra.mrb[0].mxu0 %v9303
  %v9647 = vpop.f32.mrb[0].mxu0
  %v9648 = vadd.f32 0.0, %v9647
  %v9649 = vpop.f32.mrb[0].mxu0
  %9650 = vmatprep.mubr.f32.mxu0 0.0
  %9651 = vmatmul.mubr.f32.gmra.mrb[0].mxu0 %v9306
  %v9652 = vpop.f32.mrb[0].mxu0
  %v9653 = vadd.f32 0.0, %v9652
  %v9654 = vpop.f32.mrb[0].mxu0
  %9655 = vmatprep.mubr.f32.mxu0 0.0
  %9656 = vmatmul.mubr.f32.gmra.mrb[0].mxu0 %v9309
  %v9657 = vpop.f32.mrb[0].mxu0
  %v9658 = vadd.f32 0.0, %v9657
  %v9659 = vpop.f32.mrb[0].mxu0
  %9660 = vmatprep.mubr.f32.mxu0 0.0
  %9661 = vmatmul.mubr.f32.gmra.mrb[0].mxu0 %v9312
  %v9662 = vpop.f32.mrb[0].mxu0
  %v9663 = vadd.f32 0.0, %v9662
  %v9664 = vpop.f32.mrb[0].mxu0
  %9665 = vmatprep.mubr.f32.mxu0 0.0
  %9666 = vmatmul.mubr.f32.gmra.mrb[0].mxu0 %v9315
  %v9667 = vpop.f32.mrb[0].mxu0
  %v9668 = vadd.f32 0.0, %v9667
  %v9669 = vpop.f32.mrb[0].mxu0
  %9670 = vmatprep.mubr.f32.mxu0 0.0
  %9671 = vmatmul.mubr.f32.gmra.mrb[0].mxu0 %v9318
  %v9672 = vpop.f32.mrb[0].mxu0
  %v9673 = vadd.f32 0.0, %v9672
  %v9674 = vpop.f32.mrb[0].mxu0
  %9675 = vmatprep.mubr.f32.mxu0 0.0
  %9676 = vmatmul.mubr.f32.gmra.mrb[0].mxu0 %v9321
  %v9677 = vpop.f32.mrb[0].mxu0
  %v9678 = vadd.f32 0.0, %v9677
  %v9679 = vpop.f32.mrb[0].mxu0
  %9680 = vmatprep.mubr.f32.mxu0 0.0
  %9681 = vmatmul.mubr.f32.gmra.mrb[0].mxu0 %v9324
  %v9682 = vpop.f32.mrb[0].mxu0
  %v9683 = vadd.f32 0.0, %v9682
  %v9684 = vpop.f32.mrb[0].mxu0
  %9685 = vmatprep.mubr.f32.mxu0 0.0
  %9686 = vmatmul.mubr.f32.gmra.mrb[0].mxu0 %v9327
  %v9687 = vpop.f32.mrb[0].mxu0
  %v9688 = vadd.f32 0.0, %v9687
  %v9689 = vpop.f32.mrb[0].mxu0
  %9690 = vmatprep.mubr.f32.mxu0 0.0
  %9691 = vmatmul.mubr.f32.gmra.mrb[0].mxu0 %v9330
  %v9692 = vpop.f32.mrb[0].mxu0
  %v9693 = vadd.f32 0.0, %v9692
  %v9694 = vpop.f32.mrb[0].mxu0
  %9695 = vmatprep.mubr.f32.mxu0 0.0
  %9696 = vmatmul.mubr.f32.gmra.mrb[0].mxu0 %v9333
  %v9697 = vpop.f32.mrb[0].mxu0
  %v9698 = vadd.f32 0.0, %v9697
  %v9699 = vpop.f32.mrb[0].mxu0
  %9700 = vmatprep.mubr.f32.mxu0 0.0
  %9701 = vmatmul.mubr.f32.gmra.mrb[0].mxu0 %v9336
  %v9702 = vpop.f32.mrb[0].mxu0
  %v9703 = vadd.f32 0.0, %v9702
  %v9704 = vpop.f32.mrb[0].mxu0
  %9705 = vmatprep.mubr.f32.mxu0 0.0
  %9706 = vmatmul.mubr.f32.gmra.mrb[0].mxu0 %v9339
  %v9707 = vpop.f32.mrb[0].mxu0
  %v9708 = vadd.f32 0.0, %v9707
  %v9709 = vpop.f32.mrb[0].mxu0
  %9710 = vmatprep.mubr.f32.mxu0 0.0
  %9711 = vmatmul.mubr.f32.gmra.mrb[0].mxu0 %v9342
  %v9712 = vpop.f32.mrb[0].mxu0
  %v9713 = vadd.f32 0.0, %v9712
  %v9714 = vpop.f32.mrb[0].mxu0
  %9715 = vmatprep.mubr.f32.mxu0 0.0
  %9716 = vmatmul.mubr.f32.gmra.mrb[0].mxu0 %v9345
  %v9717 = vpop.f32.mrb[0].mxu0
  %v9718 = vadd.f32 0.0, %v9717
  %v9719 = vpop.f32.mrb[0].mxu0
  %9720 = vmatprep.mubr.f32.mxu0 0.0
  %9721 = vmatmul.mubr.f32.gmra.mrb[0].mxu0 %v9348
  %v9722 = vpop.f32.mrb[0].mxu0
  %v9723 = vadd.f32 0.0, %v9722
  %v9724 = vpop.f32.mrb[0].mxu0
  %9725 = vmatprep.mubr.f32.mxu0 0.0
  %9726 = vmatmul.mubr.f32.gmra.mrb[0].mxu0 %v9351
  %v9727 = vpop.f32.mrb[0].mxu0
  %v9728 = vadd.f32 0.0, %v9727
  %v9729 = vpop.f32.mrb[0].mxu0
  %9730 = vmatprep.mubr.f32.mxu0 0.0
  %9731 = vmatmul.mubr.f32.gmra.mrb[0].mxu0 %v9354
  %v9732 = vpop.f32.mrb[0].mxu0
  %v9733 = vadd.f32 0.0, %v9732
  %v9734 = vpop.f32.mrb[0].mxu0
  %9735 = vmatprep.mubr.f32.mxu0 0.0
  %9736 = vmatmul.mubr.f32.gmra.mrb[0].mxu0 %v9357
  %v9737 = vpop.f32.mrb[0].mxu0
  %v9738 = vadd.f32 0.0, %v9737
  %v9739 = vpop.f32.mrb[0].mxu0
  %9740 = vmatprep.mubr.f32.mxu0 0.0
  %9741 = vmatmul.mubr.f32.gmra.mrb[0].mxu0 %v9360
  %v9742 = vpop.f32.mrb[0].mxu0
  %v9743 = vadd.f32 0.0, %v9742
  %v9744 = vpop.f32.mrb[0].mxu0
  %9745 = vmatprep.mubr.f32.mxu0 0.0
  %9746 = vmatmul.mubr.f32.gmra.mrb[0].mxu0 %v9363
  %v9747 = vpop.f32.mrb[0].mxu0
  %v9748 = vadd.f32 0.0, %v9747
  %v9749 = vpop.f32.mrb[0].mxu0
  %9750 = vmatprep.mubr.f32.mxu0 0.0
  %9751 = vmatmul.mubr.f32.gmra.mrb[0].mxu0 %v9366
  %v9752 = vpop.f32.mrb[0].mxu0
  %v9753 = vadd.f32 0.0, %v9752
  %v9754 = vpop.f32.mrb[0].mxu0
  %9755 = vdwg.mxu0
  %v9756 = vadd.f32 %v9048, %v9438
  %v9757 = vadd.f32 %v9049, %v9443
  %v9758 = vadd.f32 %v9050, %v9448
  %v9759 = vadd.f32 %v9051, %v9453
  %v9760 = vadd.f32 %v9052, %v9458
  %v9761 = vadd.f32 %v9053, %v9463
  %v9762 = vadd.f32 %v9054, %v9468
  %v9763 = vadd.f32 %v9055, %v9473
  %v9764 = vadd.f32 %v9056, %v9478
  %v9765 = vadd.f32 %v9057, %v9483
  %v9766 = vadd.f32 %v9058, %v9488
  %v9767 = vadd.f32 %v9059, %v9493
  %v9768 = vadd.f32 %v9060, %v9498
  %v9769 = vadd.f32 %v9061, %v9503
  %v9770 = vadd.f32 %v9062, %v9508
  %v9771 = vadd.f32 %v9063, %v9513
  %v9772 = vadd.f32 %v9064, %v9518
  %v9773 = vadd.f32 %v9065, %v9523
  %v9774 = vadd.f32 %v9066, %v9528
  %v9775 = vadd.f32 %v9067, %v9533
  %v9776 = vadd.f32 %v9068, %v9538
  %v9777 = vadd.f32 %v9069, %v9543
  %v9778 = vadd.f32 %v9070, %v9548
  %v9779 = vadd.f32 %v9071, %v9553
  %v9780 = vadd.f32 %v9072, %v9558
  %v9781 = vadd.f32 %v9073, %v9563
  %v9782 = vadd.f32 %v9074, %v9568
  %v9783 = vadd.f32 %v9075, %v9573
  %v9784 = vadd.f32 %v9076, %v9578
  %v9785 = vadd.f32 %v9077, %v9583
  %v9786 = vadd.f32 %v9078, %v9588
  %v9787 = vadd.f32 %v9079, %v9593
  %v9788 = vadd.f32 %v9080, %v9598
  %v9789 = vadd.f32 %v9081, %v9603
  %v9790 = vadd.f32 %v9082, %v9608
  %v9791 = vadd.f32 %v9083, %v9613
  %v9792 = vadd.f32 %v9084, %v9618
  %v9793 = vadd.f32 %v9085, %v9623
  %v9794 = vadd.f32 %v9086, %v9628
  %v9795 = vadd.f32 %v9087, %v9633
  %v9796 = vadd.f32 %v9088, %v9638
  %v9797 = vadd.f32 %v9089, %v9643
  %v9798 = vadd.f32 %v9090, %v9648
  %v9799 = vadd.f32 %v9091, %v9653
  %v9800 = vadd.f32 %v9092, %v9658
  %v9801 = vadd.f32 %v9093, %v9663
  %v9802 = vadd.f32 %v9094, %v9668
  %v9803 = vadd.f32 %v9095, %v9673
  %v9804 = vadd.f32 %v9096, %v9678
  %v9805 = vadd.f32 %v9097, %v9683
  %v9806 = vadd.f32 %v9098, %v9688
  %v9807 = vadd.f32 %v9099, %v9693
  %v9808 = vadd.f32 %v9100, %v9698
  %v9809 = vadd.f32 %v9101, %v9703
  %v9810 = vadd.f32 %v9102, %v9708
  %v9811 = vadd.f32 %v9103, %v9713
  %v9812 = vadd.f32 %v9104, %v9718
  %v9813 = vadd.f32 %v9105, %v9723
  %v9814 = vadd.f32 %v9106, %v9728
  %v9815 = vadd.f32 %v9107, %v9733
  %v9816 = vadd.f32 %v9108, %v9738
  %v9817 = vadd.f32 %v9109, %v9743
  %v9818 = vadd.f32 %v9110, %v9748
  %v9819 = vadd.f32 %v9111, %v9753
  %v9820 = vld [vmem:[%s196 + $0x1] sm:$0xff]
  %v9821 = vld [vmem:[%s196 + $0x9] sm:$0xff]
  %v9822 = vld [vmem:[%s196 + $0x19] sm:$0xff]
  %v9823 = vld [vmem:[%s196 + $0x21] sm:$0xff]
  %v9824 = vld [vmem:[%s196 + $0x31] sm:$0xff]
  %v9825 = vld [vmem:[%s196 + $0x39] sm:$0xff]
  %v9826 = vld [vmem:[%s196 + $0x49] sm:$0xff]
  %v9827 = vld [vmem:[%s196 + $0x51] sm:$0xff]
  %v9828 = vld [vmem:[%s196 + $0x61] sm:$0xff]
  %v9829 = vld [vmem:[%s196 + $0x69] sm:$0xff]
  %v9830 = vld [vmem:[%s196 + $0x79] sm:$0xff]
  %v9831 = vld [vmem:[%s196 + $0x81] sm:$0xff]
  %v9832 = vld [vmem:[%s196 + $0x91] sm:$0xff]
  %v9833 = vld [vmem:[%s196 + $0x99] sm:$0xff]
  %v9834 = vld [vmem:[%s196 + $0xa9] sm:$0xff]
  %v9835 = vld [vmem:[%s196 + $0xb1] sm:$0xff]
  %v9836 = vld [vmem:[%s196 + $0xc1] sm:$0xff]
  %v9837 = vld [vmem:[%s196 + $0xc9] sm:$0xff]
  %v9838 = vld [vmem:[%s196 + $0xd9] sm:$0xff]
  %v9839 = vld [vmem:[%s196 + $0xe1] sm:$0xff]
  %v9840 = vld [vmem:[%s196 + $0xf1] sm:$0xff]
  %v9841 = vld [vmem:[%s196 + $0xf9] sm:$0xff]
  %v9842 = vld [vmem:[%s196 + $0x109] sm:$0xff]
  %v9843 = vld [vmem:[%s196 + $0x111] sm:$0xff]
  %v9844 = vld [vmem:[%s196 + $0x121] sm:$0xff]
  %v9845 = vld [vmem:[%s196 + $0x129] sm:$0xff]
  %v9846 = vld [vmem:[%s196 + $0x139] sm:$0xff]
  %v9847 = vld [vmem:[%s196 + $0x141] sm:$0xff]
  %v9848 = vld [vmem:[%s196 + $0x151] sm:$0xff]
  %v9849 = vld [vmem:[%s196 + $0x159] sm:$0xff]
  %v9850 = vld [vmem:[%s196 + $0x169] sm:$0xff]
  %v9851 = vld [vmem:[%s196 + $0x171] sm:$0xff]
  %v9852 = vld [vmem:[%s196 + $0x1b1] sm:$0xff]
  %v9853 = vld [vmem:[%s196 + $0x1b9] sm:$0xff]
  %v9854 = vld [vmem:[%s196 + $0x1c9] sm:$0xff]
  %v9855 = vld [vmem:[%s196 + $0x1d1] sm:$0xff]
  %v9856 = vld [vmem:[%s196 + $0x1e1] sm:$0xff]
  %v9857 = vld [vmem:[%s196 + $0x1e9] sm:$0xff]
  %v9858 = vld [vmem:[%s196 + $0x1f9] sm:$0xff]
  %v9859 = vld [vmem:[%s196 + $0x201] sm:$0xff]
  %v9860 = vld [vmem:[%s196 + $0x211] sm:$0xff]
  %v9861 = vld [vmem:[%s196 + $0x219] sm:$0xff]
  %v9862 = vld [vmem:[%s196 + $0x229] sm:$0xff]
  %v9863 = vld [vmem:[%s196 + $0x231] sm:$0xff]
  %v9864 = vld [vmem:[%s196 + $0x241] sm:$0xff]
  %v9865 = vld [vmem:[%s196 + $0x249] sm:$0xff]
  %v9866 = vld [vmem:[%s196 + $0x259] sm:$0xff]
  %v9867 = vld [vmem:[%s196 + $0x261] sm:$0xff]
  %v9868 = vld [vmem:[%s196 + $0x271] sm:$0xff]
  %v9869 = vld [vmem:[%s196 + $0x279] sm:$0xff]
  %v9870 = vld [vmem:[%s196 + $0x289] sm:$0xff]
  %v9871 = vld [vmem:[%s196 + $0x291] sm:$0xff]
  %v9872 = vld [vmem:[%s196 + $0x2a1] sm:$0xff]
  %v9873 = vld [vmem:[%s196 + $0x2a9] sm:$0xff]
  %v9874 = vld [vmem:[%s196 + $0x2b9] sm:$0xff]
  %v9875 = vld [vmem:[%s196 + $0x2c1] sm:$0xff]
  %v9876 = vld [vmem:[%s196 + $0x2d1] sm:$0xff]
  %v9877 = vld [vmem:[%s196 + $0x2d9] sm:$0xff]
  %v9878 = vld [vmem:[%s196 + $0x2e9] sm:$0xff]
  %v9879 = vld [vmem:[%s196 + $0x2f1] sm:$0xff]
  %v9880 = vld [vmem:[%s196 + $0x301] sm:$0xff]
  %v9881 = vld [vmem:[%s196 + $0x309] sm:$0xff]
  %v9882 = vld [vmem:[%s196 + $0x319] sm:$0xff]
  %v9883 = vld [vmem:[%s196 + $0x321] sm:$0xff]
  %v9885 = vsel %vm44, %v9820, 0
  %v9888 = vsel %vm44, %v9821, 0
  %v9891 = vsel %vm44, %v9822, 0
  %v9894 = vsel %vm44, %v9823, 0
  %v9897 = vsel %vm44, %v9824, 0
  %v9900 = vsel %vm44, %v9825, 0
  %v9903 = vsel %vm44, %v9826, 0
  %v9906 = vsel %vm44, %v9827, 0
  %v9909 = vsel %vm44, %v9828, 0
  %v9912 = vsel %vm44, %v9829, 0
  %v9915 = vsel %vm44, %v9830, 0
  %v9918 = vsel %vm44, %v9831, 0
  %v9921 = vsel %vm44, %v9832, 0
  %v9924 = vsel %vm44, %v9833, 0
  %v9927 = vsel %vm44, %v9834, 0
  %v9930 = vsel %vm44, %v9835, 0
  %v9933 = vsel %vm44, %v9836, 0
  %v9936 = vsel %vm44, %v9837, 0
  %v9939 = vsel %vm44, %v9838, 0
  %v9942 = vsel %vm44, %v9839, 0
  %v9945 = vsel %vm44, %v9840, 0
  %v9948 = vsel %vm44, %v9841, 0
  %v9951 = vsel %vm44, %v9842, 0
  %v9954 = vsel %vm44, %v9843, 0
  %v9957 = vsel %vm44, %v9844, 0
  %v9960 = vsel %vm44, %v9845, 0
  %v9963 = vsel %vm44, %v9846, 0
  %v9966 = vsel %vm44, %v9847, 0
  %v9969 = vsel %vm44, %v9848, 0
  %v9972 = vsel %vm44, %v9849, 0
  %v9975 = vsel %vm44, %v9850, 0
  %v9978 = vsel %vm44, %v9851, 0
  %v9981 = vsel %vm44, %v9852, 0
  %v9984 = vsel %vm44, %v9853, 0
  %v9987 = vsel %vm44, %v9854, 0
  %v9990 = vsel %vm44, %v9855, 0
  %v9993 = vsel %vm44, %v9856, 0
  %v9996 = vsel %vm44, %v9857, 0
  %v9999 = vsel %vm44, %v9858, 0
  %v10002 = vsel %vm44, %v9859, 0
  %v10005 = vsel %vm44, %v9860, 0
  %v10008 = vsel %vm44, %v9861, 0
  %v10011 = vsel %vm44, %v9862, 0
  %v10014 = vsel %vm44, %v9863, 0
  %v10017 = vsel %vm44, %v9864, 0
  %v10020 = vsel %vm44, %v9865, 0
  %v10023 = vsel %vm44, %v9866, 0
  %v10026 = vsel %vm44, %v9867, 0
  %v10029 = vsel %vm44, %v9868, 0
  %v10032 = vsel %vm44, %v9869, 0
  %v10035 = vsel %vm44, %v9870, 0
  %v10038 = vsel %vm44, %v9871, 0
  %v10041 = vsel %vm44, %v9872, 0
  %v10044 = vsel %vm44, %v9873, 0
  %v10047 = vsel %vm44, %v9874, 0
  %v10050 = vsel %vm44, %v9875, 0
  %v10053 = vsel %vm44, %v9876, 0
  %v10056 = vsel %vm44, %v9877, 0
  %v10059 = vsel %vm44, %v9878, 0
  %v10062 = vsel %vm44, %v9879, 0
  %v10065 = vsel %vm44, %v9880, 0
  %v10068 = vsel %vm44, %v9881, 0
  %v10071 = vsel %vm44, %v9882, 0
  %v10074 = vsel %vm44, %v9883, 0
  %v10077 = vsel %vm581, %v39, 0
  %10079 = vmatprep.subr.mxu0 0.0
  %10080 = vmatpush1.msra.mxu0 %v10077
  %10081 = vmatprep.subr.mxu0 0.0
  %10082 = vmatpush1.msra.mxu0 0.0
  %10083 = vmatprep.subr.mxu0 0.0
  %10084 = vmatpush1.msra.mxu0 0.0
  %10085 = vmatprep.subr.mxu0 0.0
  %10086 = vmatpush1.msra.mxu0 0.0
  %10087 = vmatprep.subr.mxu0 0.0
  %10088 = vmatpush1.msra.mxu0 0.0
  %10089 = vmatprep.subr.mxu0 0.0
  %10090 = vmatpush1.msra.mxu0 0.0
  %10091 = vmatprep.subr.mxu0 0.0
  %10092 = vmatpush1.msra.mxu0 0.0
  %10093 = vmatprep.subr.mxu0 0.0
  %10094 = vmatpush1.msra.mxu0 0.0
  %10095 = vmatprep.subr.mxu0 0.0
  %10096 = vmatpush1.msra.mxu0 0.0
  %10097 = vmatprep.subr.mxu0 0.0
  %10098 = vmatpush1.msra.mxu0 0.0
  %10099 = vmatprep.subr.mxu0 0.0
  %10100 = vmatpush1.msra.mxu0 0.0
  %10101 = vmatprep.subr.mxu0 0.0
  %10102 = vmatpush1.msra.mxu0 0.0
  %10103 = vmatprep.subr.mxu0 0.0
  %10104 = vmatpush1.msra.mxu0 0.0
  %10105 = vmatprep.subr.mxu0 0.0
  %10106 = vmatpush1.msra.mxu0 0.0
  %10107 = vmatprep.subr.mxu0 0.0
  %10108 = vmatpush1.msra.mxu0 0.0
  %10109 = vmatprep.subr.mxu0 0.0
  %10110 = vmatpush1.msra.mxu0 0.0
  %10111 = vmatprep.subr.mxu0 0.0
  %10112 = vmatpush1.msra.mxu0 0.0
  %10113 = vmatprep.subr.mxu0 0.0
  %10114 = vmatpush1.msra.mxu0 0.0
  %10115 = vmatprep.subr.mxu0 0.0
  %10116 = vmatpush1.msra.mxu0 0.0
  %10117 = vmatprep.subr.mxu0 0.0
  %10118 = vmatpush1.msra.mxu0 0.0
  %10119 = vmatprep.subr.mxu0 0.0
  %10120 = vmatpush1.msra.mxu0 0.0
  %10121 = vmatprep.subr.mxu0 0.0
  %10122 = vmatpush1.msra.mxu0 0.0
  %10123 = vmatprep.subr.mxu0 0.0
  %10124 = vmatpush1.msra.mxu0 0.0
  %10125 = vmatprep.subr.mxu0 0.0
  %10126 = vmatpush1.msra.mxu0 0.0
  %10127 = vmatprep.subr.mxu0 0.0
  %10128 = vmatpush1.msra.mxu0 0.0
  %10129 = vmatprep.subr.mxu0 0.0
  %10130 = vmatpush1.msra.mxu0 0.0
  %10131 = vmatprep.subr.mxu0 0.0
  %10132 = vmatpush1.msra.mxu0 0.0
  %10133 = vmatprep.subr.mxu0 0.0
  %10134 = vmatpush1.msra.mxu0 0.0
  %10135 = vmatprep.subr.mxu0 0.0
  %10136 = vmatpush1.msra.mxu0 0.0
  %10137 = vmatprep.subr.mxu0 0.0
  %10138 = vmatpush1.msra.mxu0 0.0
  %10139 = vmatprep.subr.mxu0 0.0
  %10140 = vmatpush1.msra.mxu0 0.0
  %10141 = vmatprep.subr.mxu0 0.0
  %10142 = vmatpush1.msra.mxu0 0.0
  %10143 = vmatprep.mubr.f32.mxu0 0.0
  %10144 = vmatmul.mubr.f32.gmra.mrb[0].mxu0 %v9885
  %v10145 = vpop.f32.mrb[0].mxu0
  %v10146 = vadd.f32 0.0, %v10145
  %v10147 = vpop.f32.mrb[0].mxu0
  %10148 = vmatprep.mubr.f32.mxu0 0.0
  %10149 = vmatmul.mubr.f32.gmra.mrb[0].mxu0 %v9888
  %v10150 = vpop.f32.mrb[0].mxu0
  %v10151 = vadd.f32 0.0, %v10150
  %v10152 = vpop.f32.mrb[0].mxu0
  %10153 = vmatprep.mubr.f32.mxu0 0.0
  %10154 = vmatmul.mubr.f32.gmra.mrb[0].mxu0 %v9891
  %v10155 = vpop.f32.mrb[0].mxu0
  %v10156 = vadd.f32 0.0, %v10155
  %v10157 = vpop.f32.mrb[0].mxu0
  %10158 = vmatprep.mubr.f32.mxu0 0.0
  %10159 = vmatmul.mubr.f32.gmra.mrb[0].mxu0 %v9894
  %v10160 = vpop.f32.mrb[0].mxu0
  %v10161 = vadd.f32 0.0, %v10160
  %v10162 = vpop.f32.mrb[0].mxu0
  %10163 = vmatprep.mubr.f32.mxu0 0.0
  %10164 = vmatmul.mubr.f32.gmra.mrb[0].mxu0 %v9897
  %v10165 = vpop.f32.mrb[0].mxu0
  %v10166 = vadd.f32 0.0, %v10165
  %v10167 = vpop.f32.mrb[0].mxu0
  %10168 = vmatprep.mubr.f32.mxu0 0.0
  %10169 = vmatmul.mubr.f32.gmra.mrb[0].mxu0 %v9900
  %v10170 = vpop.f32.mrb[0].mxu0
  %v10171 = vadd.f32 0.0, %v10170
  %v10172 = vpop.f32.mrb[0].mxu0
  %10173 = vmatprep.mubr.f32.mxu0 0.0
  %10174 = vmatmul.mubr.f32.gmra.mrb[0].mxu0 %v9903
  %v10175 = vpop.f32.mrb[0].mxu0
  %v10176 = vadd.f32 0.0, %v10175
  %v10177 = vpop.f32.mrb[0].mxu0
  %10178 = vmatprep.mubr.f32.mxu0 0.0
  %10179 = vmatmul.mubr.f32.gmra.mrb[0].mxu0 %v9906
  %v10180 = vpop.f32.mrb[0].mxu0
  %v10181 = vadd.f32 0.0, %v10180
  %v10182 = vpop.f32.mrb[0].mxu0
  %10183 = vmatprep.mubr.f32.mxu0 0.0
  %10184 = vmatmul.mubr.f32.gmra.mrb[0].mxu0 %v9909
  %v10185 = vpop.f32.mrb[0].mxu0
  %v10186 = vadd.f32 0.0, %v10185
  %v10187 = vpop.f32.mrb[0].mxu0
  %10188 = vmatprep.mubr.f32.mxu0 0.0
  %10189 = vmatmul.mubr.f32.gmra.mrb[0].mxu0 %v9912
  %v10190 = vpop.f32.mrb[0].mxu0
  %v10191 = vadd.f32 0.0, %v10190
  %v10192 = vpop.f32.mrb[0].mxu0
  %10193 = vmatprep.mubr.f32.mxu0 0.0
  %10194 = vmatmul.mubr.f32.gmra.mrb[0].mxu0 %v9915
  %v10195 = vpop.f32.mrb[0].mxu0
  %v10196 = vadd.f32 0.0, %v10195
  %v10197 = vpop.f32.mrb[0].mxu0
  %10198 = vmatprep.mubr.f32.mxu0 0.0
  %10199 = vmatmul.mubr.f32.gmra.mrb[0].mxu0 %v9918
  %v10200 = vpop.f32.mrb[0].mxu0
  %v10201 = vadd.f32 0.0, %v10200
  %v10202 = vpop.f32.mrb[0].mxu0
  %10203 = vmatprep.mubr.f32.mxu0 0.0
  %10204 = vmatmul.mubr.f32.gmra.mrb[0].mxu0 %v9921
  %v10205 = vpop.f32.mrb[0].mxu0
  %v10206 = vadd.f32 0.0, %v10205
  %v10207 = vpop.f32.mrb[0].mxu0
  %10208 = vmatprep.mubr.f32.mxu0 0.0
  %10209 = vmatmul.mubr.f32.gmra.mrb[0].mxu0 %v9924
  %v10210 = vpop.f32.mrb[0].mxu0
  %v10211 = vadd.f32 0.0, %v10210
  %v10212 = vpop.f32.mrb[0].mxu0
  %10213 = vmatprep.mubr.f32.mxu0 0.0
  %10214 = vmatmul.mubr.f32.gmra.mrb[0].mxu0 %v9927
  %v10215 = vpop.f32.mrb[0].mxu0
  %v10216 = vadd.f32 0.0, %v10215
  %v10217 = vpop.f32.mrb[0].mxu0
  %10218 = vmatprep.mubr.f32.mxu0 0.0
  %10219 = vmatmul.mubr.f32.gmra.mrb[0].mxu0 %v9930
  %v10220 = vpop.f32.mrb[0].mxu0
  %v10221 = vadd.f32 0.0, %v10220
  %v10222 = vpop.f32.mrb[0].mxu0
  %10223 = vmatprep.mubr.f32.mxu0 0.0
  %10224 = vmatmul.mubr.f32.gmra.mrb[0].mxu0 %v9933
  %v10225 = vpop.f32.mrb[0].mxu0
  %v10226 = vadd.f32 0.0, %v10225
  %v10227 = vpop.f32.mrb[0].mxu0
  %10228 = vmatprep.mubr.f32.mxu0 0.0
  %10229 = vmatmul.mubr.f32.gmra.mrb[0].mxu0 %v9936
  %v10230 = vpop.f32.mrb[0].mxu0
  %v10231 = vadd.f32 0.0, %v10230
  %v10232 = vpop.f32.mrb[0].mxu0
  %10233 = vmatprep.mubr.f32.mxu0 0.0
  %10234 = vmatmul.mubr.f32.gmra.mrb[0].mxu0 %v9939
  %v10235 = vpop.f32.mrb[0].mxu0
  %v10236 = vadd.f32 0.0, %v10235
  %v10237 = vpop.f32.mrb[0].mxu0
  %10238 = vmatprep.mubr.f32.mxu0 0.0
  %10239 = vmatmul.mubr.f32.gmra.mrb[0].mxu0 %v9942
  %v10240 = vpop.f32.mrb[0].mxu0
  %v10241 = vadd.f32 0.0, %v10240
  %v10242 = vpop.f32.mrb[0].mxu0
  %10243 = vmatprep.mubr.f32.mxu0 0.0
  %10244 = vmatmul.mubr.f32.gmra.mrb[0].mxu0 %v9945
  %v10245 = vpop.f32.mrb[0].mxu0
  %v10246 = vadd.f32 0.0, %v10245
  %v10247 = vpop.f32.mrb[0].mxu0
  %10248 = vmatprep.mubr.f32.mxu0 0.0
  %10249 = vmatmul.mubr.f32.gmra.mrb[0].mxu0 %v9948
  %v10250 = vpop.f32.mrb[0].mxu0
  %v10251 = vadd.f32 0.0, %v10250
  %v10252 = vpop.f32.mrb[0].mxu0
  %10253 = vmatprep.mubr.f32.mxu0 0.0
  %10254 = vmatmul.mubr.f32.gmra.mrb[0].mxu0 %v9951
  %v10255 = vpop.f32.mrb[0].mxu0
  %v10256 = vadd.f32 0.0, %v10255
  %v10257 = vpop.f32.mrb[0].mxu0
  %10258 = vmatprep.mubr.f32.mxu0 0.0
  %10259 = vmatmul.mubr.f32.gmra.mrb[0].mxu0 %v9954
  %v10260 = vpop.f32.mrb[0].mxu0
  %v10261 = vadd.f32 0.0, %v10260
  %v10262 = vpop.f32.mrb[0].mxu0
  %10263 = vmatprep.mubr.f32.mxu0 0.0
  %10264 = vmatmul.mubr.f32.gmra.mrb[0].mxu0 %v9957
  %v10265 = vpop.f32.mrb[0].mxu0
  %v10266 = vadd.f32 0.0, %v10265
  %v10267 = vpop.f32.mrb[0].mxu0
  %10268 = vmatprep.mubr.f32.mxu0 0.0
  %10269 = vmatmul.mubr.f32.gmra.mrb[0].mxu0 %v9960
  %v10270 = vpop.f32.mrb[0].mxu0
  %v10271 = vadd.f32 0.0, %v10270
  %v10272 = vpop.f32.mrb[0].mxu0
  %10273 = vmatprep.mubr.f32.mxu0 0.0
  %10274 = vmatmul.mubr.f32.gmra.mrb[0].mxu0 %v9963
  %v10275 = vpop.f32.mrb[0].mxu0
  %v10276 = vadd.f32 0.0, %v10275
  %v10277 = vpop.f32.mrb[0].mxu0
  %10278 = vmatprep.mubr.f32.mxu0 0.0
  %10279 = vmatmul.mubr.f32.gmra.mrb[0].mxu0 %v9966
  %v10280 = vpop.f32.mrb[0].mxu0
  %v10281 = vadd.f32 0.0, %v10280
  %v10282 = vpop.f32.mrb[0].mxu0
  %10283 = vmatprep.mubr.f32.mxu0 0.0
  %10284 = vmatmul.mubr.f32.gmra.mrb[0].mxu0 %v9969
  %v10285 = vpop.f32.mrb[0].mxu0
  %v10286 = vadd.f32 0.0, %v10285
  %v10287 = vpop.f32.mrb[0].mxu0
  %10288 = vmatprep.mubr.f32.mxu0 0.0
  %10289 = vmatmul.mubr.f32.gmra.mrb[0].mxu0 %v9972
  %v10290 = vpop.f32.mrb[0].mxu0
  %v10291 = vadd.f32 0.0, %v10290
  %v10292 = vpop.f32.mrb[0].mxu0
  %10293 = vmatprep.mubr.f32.mxu0 0.0
  %10294 = vmatmul.mubr.f32.gmra.mrb[0].mxu0 %v9975
  %v10295 = vpop.f32.mrb[0].mxu0
  %v10296 = vadd.f32 0.0, %v10295
  %v10297 = vpop.f32.mrb[0].mxu0
  %10298 = vmatprep.mubr.f32.mxu0 0.0
  %10299 = vmatmul.mubr.f32.gmra.mrb[0].mxu0 %v9978
  %v10300 = vpop.f32.mrb[0].mxu0
  %v10301 = vadd.f32 0.0, %v10300
  %v10302 = vpop.f32.mrb[0].mxu0
  %10303 = vmatprep.mubr.f32.mxu0 0.0
  %10304 = vmatmul.mubr.f32.gmra.mrb[0].mxu0 %v9981
  %v10305 = vpop.f32.mrb[0].mxu0
  %v10306 = vadd.f32 0.0, %v10305
  %v10307 = vpop.f32.mrb[0].mxu0
  %10308 = vmatprep.mubr.f32.mxu0 0.0
  %10309 = vmatmul.mubr.f32.gmra.mrb[0].mxu0 %v9984
  %v10310 = vpop.f32.mrb[0].mxu0
  %v10311 = vadd.f32 0.0, %v10310
  %v10312 = vpop.f32.mrb[0].mxu0
  %10313 = vmatprep.mubr.f32.mxu0 0.0
  %10314 = vmatmul.mubr.f32.gmra.mrb[0].mxu0 %v9987
  %v10315 = vpop.f32.mrb[0].mxu0
  %v10316 = vadd.f32 0.0, %v10315
  %v10317 = vpop.f32.mrb[0].mxu0
  %10318 = vmatprep.mubr.f32.mxu0 0.0
  %10319 = vmatmul.mubr.f32.gmra.mrb[0].mxu0 %v9990
  %v10320 = vpop.f32.mrb[0].mxu0
  %v10321 = vadd.f32 0.0, %v10320
  %v10322 = vpop.f32.mrb[0].mxu0
  %10323 = vmatprep.mubr.f32.mxu0 0.0
  %10324 = vmatmul.mubr.f32.gmra.mrb[0].mxu0 %v9993
  %v10325 = vpop.f32.mrb[0].mxu0
  %v10326 = vadd.f32 0.0, %v10325
  %v10327 = vpop.f32.mrb[0].mxu0
  %10328 = vmatprep.mubr.f32.mxu0 0.0
  %10329 = vmatmul.mubr.f32.gmra.mrb[0].mxu0 %v9996
  %v10330 = vpop.f32.mrb[0].mxu0
  %v10331 = vadd.f32 0.0, %v10330
  %v10332 = vpop.f32.mrb[0].mxu0
  %10333 = vmatprep.mubr.f32.mxu0 0.0
  %10334 = vmatmul.mubr.f32.gmra.mrb[0].mxu0 %v9999
  %v10335 = vpop.f32.mrb[0].mxu0
  %v10336 = vadd.f32 0.0, %v10335
  %v10337 = vpop.f32.mrb[0].mxu0
  %10338 = vmatprep.mubr.f32.mxu0 0.0
  %10339 = vmatmul.mubr.f32.gmra.mrb[0].mxu0 %v10002
  %v10340 = vpop.f32.mrb[0].mxu0
  %v10341 = vadd.f32 0.0, %v10340
  %v10342 = vpop.f32.mrb[0].mxu0
  %10343 = vmatprep.mubr.f32.mxu0 0.0
  %10344 = vmatmul.mubr.f32.gmra.mrb[0].mxu0 %v10005
  %v10345 = vpop.f32.mrb[0].mxu0
  %v10346 = vadd.f32 0.0, %v10345
  %v10347 = vpop.f32.mrb[0].mxu0
  %10348 = vmatprep.mubr.f32.mxu0 0.0
  %10349 = vmatmul.mubr.f32.gmra.mrb[0].mxu0 %v10008
  %v10350 = vpop.f32.mrb[0].mxu0
  %v10351 = vadd.f32 0.0, %v10350
  %v10352 = vpop.f32.mrb[0].mxu0
  %10353 = vmatprep.mubr.f32.mxu0 0.0
  %10354 = vmatmul.mubr.f32.gmra.mrb[0].mxu0 %v10011
  %v10355 = vpop.f32.mrb[0].mxu0
  %v10356 = vadd.f32 0.0, %v10355
  %v10357 = vpop.f32.mrb[0].mxu0
  %10358 = vmatprep.mubr.f32.mxu0 0.0
  %10359 = vmatmul.mubr.f32.gmra.mrb[0].mxu0 %v10014
  %v10360 = vpop.f32.mrb[0].mxu0
  %v10361 = vadd.f32 0.0, %v10360
  %v10362 = vpop.f32.mrb[0].mxu0
  %10363 = vmatprep.mubr.f32.mxu0 0.0
  %10364 = vmatmul.mubr.f32.gmra.mrb[0].mxu0 %v10017
  %v10365 = vpop.f32.mrb[0].mxu0
  %v10366 = vadd.f32 0.0, %v10365
  %v10367 = vpop.f32.mrb[0].mxu0
  %10368 = vmatprep.mubr.f32.mxu0 0.0
  %10369 = vmatmul.mubr.f32.gmra.mrb[0].mxu0 %v10020
  %v10370 = vpop.f32.mrb[0].mxu0
  %v10371 = vadd.f32 0.0, %v10370
  %v10372 = vpop.f32.mrb[0].mxu0
  %10373 = vmatprep.mubr.f32.mxu0 0.0
  %10374 = vmatmul.mubr.f32.gmra.mrb[0].mxu0 %v10023
  %v10375 = vpop.f32.mrb[0].mxu0
  %v10376 = vadd.f32 0.0, %v10375
  %v10377 = vpop.f32.mrb[0].mxu0
  %10378 = vmatprep.mubr.f32.mxu0 0.0
  %10379 = vmatmul.mubr.f32.gmra.mrb[0].mxu0 %v10026
  %v10380 = vpop.f32.mrb[0].mxu0
  %v10381 = vadd.f32 0.0, %v10380
  %v10382 = vpop.f32.mrb[0].mxu0
  %10383 = vmatprep.mubr.f32.mxu0 0.0
  %10384 = vmatmul.mubr.f32.gmra.mrb[0].mxu0 %v10029
  %v10385 = vpop.f32.mrb[0].mxu0
  %v10386 = vadd.f32 0.0, %v10385
  %v10387 = vpop.f32.mrb[0].mxu0
  %10388 = vmatprep.mubr.f32.mxu0 0.0
  %10389 = vmatmul.mubr.f32.gmra.mrb[0].mxu0 %v10032
  %v10390 = vpop.f32.mrb[0].mxu0
  %v10391 = vadd.f32 0.0, %v10390
  %v10392 = vpop.f32.mrb[0].mxu0
  %10393 = vmatprep.mubr.f32.mxu0 0.0
  %10394 = vmatmul.mubr.f32.gmra.mrb[0].mxu0 %v10035
  %v10395 = vpop.f32.mrb[0].mxu0
  %v10396 = vadd.f32 0.0, %v10395
  %v10397 = vpop.f32.mrb[0].mxu0
  %10398 = vmatprep.mubr.f32.mxu0 0.0
  %10399 = vmatmul.mubr.f32.gmra.mrb[0].mxu0 %v10038
  %v10400 = vpop.f32.mrb[0].mxu0
  %v10401 = vadd.f32 0.0, %v10400
  %v10402 = vpop.f32.mrb[0].mxu0
  %10403 = vmatprep.mubr.f32.mxu0 0.0
  %10404 = vmatmul.mubr.f32.gmra.mrb[0].mxu0 %v10041
  %v10405 = vpop.f32.mrb[0].mxu0
  %v10406 = vadd.f32 0.0, %v10405
  %v10407 = vpop.f32.mrb[0].mxu0
  %10408 = vmatprep.mubr.f32.mxu0 0.0
  %10409 = vmatmul.mubr.f32.gmra.mrb[0].mxu0 %v10044
  %v10410 = vpop.f32.mrb[0].mxu0
  %v10411 = vadd.f32 0.0, %v10410
  %v10412 = vpop.f32.mrb[0].mxu0
  %10413 = vmatprep.mubr.f32.mxu0 0.0
  %10414 = vmatmul.mubr.f32.gmra.mrb[0].mxu0 %v10047
  %v10415 = vpop.f32.mrb[0].mxu0
  %v10416 = vadd.f32 0.0, %v10415
  %v10417 = vpop.f32.mrb[0].mxu0
  %10418 = vmatprep.mubr.f32.mxu0 0.0
  %10419 = vmatmul.mubr.f32.gmra.mrb[0].mxu0 %v10050
  %v10420 = vpop.f32.mrb[0].mxu0
  %v10421 = vadd.f32 0.0, %v10420
  %v10422 = vpop.f32.mrb[0].mxu0
  %10423 = vmatprep.mubr.f32.mxu0 0.0
  %10424 = vmatmul.mubr.f32.gmra.mrb[0].mxu0 %v10053
  %v10425 = vpop.f32.mrb[0].mxu0
  %v10426 = vadd.f32 0.0, %v10425
  %v10427 = vpop.f32.mrb[0].mxu0
  %10428 = vmatprep.mubr.f32.mxu0 0.0
  %10429 = vmatmul.mubr.f32.gmra.mrb[0].mxu0 %v10056
  %v10430 = vpop.f32.mrb[0].mxu0
  %v10431 = vadd.f32 0.0, %v10430
  %v10432 = vpop.f32.mrb[0].mxu0
  %10433 = vmatprep.mubr.f32.mxu0 0.0
  %10434 = vmatmul.mubr.f32.gmra.mrb[0].mxu0 %v10059
  %v10435 = vpop.f32.mrb[0].mxu0
  %v10436 = vadd.f32 0.0, %v10435
  %v10437 = vpop.f32.mrb[0].mxu0
  %10438 = vmatprep.mubr.f32.mxu0 0.0
  %10439 = vmatmul.mubr.f32.gmra.mrb[0].mxu0 %v10062
  %v10440 = vpop.f32.mrb[0].mxu0
  %v10441 = vadd.f32 0.0, %v10440
  %v10442 = vpop.f32.mrb[0].mxu0
  %10443 = vmatprep.mubr.f32.mxu0 0.0
  %10444 = vmatmul.mubr.f32.gmra.mrb[0].mxu0 %v10065
  %v10445 = vpop.f32.mrb[0].mxu0
  %v10446 = vadd.f32 0.0, %v10445
  %v10447 = vpop.f32.mrb[0].mxu0
  %10448 = vmatprep.mubr.f32.mxu0 0.0
  %10449 = vmatmul.mubr.f32.gmra.mrb[0].mxu0 %v10068
  %v10450 = vpop.f32.mrb[0].mxu0
  %v10451 = vadd.f32 0.0, %v10450
  %v10452 = vpop.f32.mrb[0].mxu0
  %10453 = vmatprep.mubr.f32.mxu0 0.0
  %10454 = vmatmul.mubr.f32.gmra.mrb[0].mxu0 %v10071
  %v10455 = vpop.f32.mrb[0].mxu0
  %v10456 = vadd.f32 0.0, %v10455
  %v10457 = vpop.f32.mrb[0].mxu0
  %10458 = vmatprep.mubr.f32.mxu0 0.0
  %10459 = vmatmul.mubr.f32.gmra.mrb[0].mxu0 %v10074
  %v10460 = vpop.f32.mrb[0].mxu0
  %v10461 = vadd.f32 0.0, %v10460
  %v10462 = vpop.f32.mrb[0].mxu0
  %10463 = vdwg.mxu0
  %v10464 = vadd.f32 %v9756, %v10146
  %v10465 = vadd.f32 %v9757, %v10151
  %v10466 = vadd.f32 %v9758, %v10156
  %v10467 = vadd.f32 %v9759, %v10161
  %v10468 = vadd.f32 %v9760, %v10166
  %v10469 = vadd.f32 %v9761, %v10171
  %v10470 = vadd.f32 %v9762, %v10176
  %v10471 = vadd.f32 %v9763, %v10181
  %v10472 = vadd.f32 %v9764, %v10186
  %v10473 = vadd.f32 %v9765, %v10191
  %v10474 = vadd.f32 %v9766, %v10196
  %v10475 = vadd.f32 %v9767, %v10201
  %v10476 = vadd.f32 %v9768, %v10206
  %v10477 = vadd.f32 %v9769, %v10211
  %v10478 = vadd.f32 %v9770, %v10216
  %v10479 = vadd.f32 %v9771, %v10221
  %v10480 = vadd.f32 %v9772, %v10226
  %v10481 = vadd.f32 %v9773, %v10231
  %v10482 = vadd.f32 %v9774, %v10236
  %v10483 = vadd.f32 %v9775, %v10241
  %v10484 = vadd.f32 %v9776, %v10246
  %v10485 = vadd.f32 %v9777, %v10251
  %v10486 = vadd.f32 %v9778, %v10256
  %v10487 = vadd.f32 %v9779, %v10261
  %v10488 = vadd.f32 %v9780, %v10266
  %v10489 = vadd.f32 %v9781, %v10271
  %v10490 = vadd.f32 %v9782, %v10276
  %v10491 = vadd.f32 %v9783, %v10281
  %v10492 = vadd.f32 %v9784, %v10286
  %v10493 = vadd.f32 %v9785, %v10291
  %v10494 = vadd.f32 %v9786, %v10296
  %v10495 = vadd.f32 %v9787, %v10301
  %v10496 = vadd.f32 %v9788, %v10306
  %v10497 = vadd.f32 %v9789, %v10311
  %v10498 = vadd.f32 %v9790, %v10316
  %v10499 = vadd.f32 %v9791, %v10321
  %v10500 = vadd.f32 %v9792, %v10326
  %v10501 = vadd.f32 %v9793, %v10331
  %v10502 = vadd.f32 %v9794, %v10336
  %v10503 = vadd.f32 %v9795, %v10341
  %v10504 = vadd.f32 %v9796, %v10346
  %v10505 = vadd.f32 %v9797, %v10351
  %v10506 = vadd.f32 %v9798, %v10356
  %v10507 = vadd.f32 %v9799, %v10361
  %v10508 = vadd.f32 %v9800, %v10366
  %v10509 = vadd.f32 %v9801, %v10371
  %v10510 = vadd.f32 %v9802, %v10376
  %v10511 = vadd.f32 %v9803, %v10381
  %v10512 = vadd.f32 %v9804, %v10386
  %v10513 = vadd.f32 %v9805, %v10391
  %v10514 = vadd.f32 %v9806, %v10396
  %v10515 = vadd.f32 %v9807, %v10401
  %v10516 = vadd.f32 %v9808, %v10406
  %v10517 = vadd.f32 %v9809, %v10411
  %v10518 = vadd.f32 %v9810, %v10416
  %v10519 = vadd.f32 %v9811, %v10421
  %v10520 = vadd.f32 %v9812, %v10426
  %v10521 = vadd.f32 %v9813, %v10431
  %v10522 = vadd.f32 %v9814, %v10436
  %v10523 = vadd.f32 %v9815, %v10441
  %v10524 = vadd.f32 %v9816, %v10446
  %v10525 = vadd.f32 %v9817, %v10451
  %v10526 = vadd.f32 %v9818, %v10456
  %v10527 = vadd.f32 %v9819, %v10461
  %v10528 = vld [vmem:[%s196 + $0x2] sm:$0xff]
  %v10529 = vld [vmem:[%s196 + $0xa] sm:$0xff]
  %v10530 = vld [vmem:[%s196 + $0x1a] sm:$0xff]
  %v10531 = vld [vmem:[%s196 + $0x22] sm:$0xff]
  %v10532 = vld [vmem:[%s196 + $0x32] sm:$0xff]
  %v10533 = vld [vmem:[%s196 + $0x3a] sm:$0xff]
  %v10534 = vld [vmem:[%s196 + $0x4a] sm:$0xff]
  %v10535 = vld [vmem:[%s196 + $0x52] sm:$0xff]
  %v10536 = vld [vmem:[%s196 + $0x62] sm:$0xff]
  %v10537 = vld [vmem:[%s196 + $0x6a] sm:$0xff]
  %v10538 = vld [vmem:[%s196 + $0x7a] sm:$0xff]
  %v10539 = vld [vmem:[%s196 + $0x82] sm:$0xff]
  %v10540 = vld [vmem:[%s196 + $0x92] sm:$0xff]
  %v10541 = vld [vmem:[%s196 + $0x9a] sm:$0xff]
  %v10542 = vld [vmem:[%s196 + $0xaa] sm:$0xff]
  %v10543 = vld [vmem:[%s196 + $0xb2] sm:$0xff]
  %v10544 = vld [vmem:[%s196 + $0xc2] sm:$0xff]
  %v10545 = vld [vmem:[%s196 + $0xca] sm:$0xff]
  %v10546 = vld [vmem:[%s196 + $0xda] sm:$0xff]
  %v10547 = vld [vmem:[%s196 + $0xe2] sm:$0xff]
  %v10548 = vld [vmem:[%s196 + $0xf2] sm:$0xff]
  %v10549 = vld [vmem:[%s196 + $0xfa] sm:$0xff]
  %v10550 = vld [vmem:[%s196 + $0x10a] sm:$0xff]
  %v10551 = vld [vmem:[%s196 + $0x112] sm:$0xff]
  %v10552 = vld [vmem:[%s196 + $0x122] sm:$0xff]
  %v10553 = vld [vmem:[%s196 + $0x12a] sm:$0xff]
  %v10554 = vld [vmem:[%s196 + $0x13a] sm:$0xff]
  %v10555 = vld [vmem:[%s196 + $0x142] sm:$0xff]
  %v10556 = vld [vmem:[%s196 + $0x152] sm:$0xff]
  %v10557 = vld [vmem:[%s196 + $0x15a] sm:$0xff]
  %v10558 = vld [vmem:[%s196 + $0x16a] sm:$0xff]
  %v10559 = vld [vmem:[%s196 + $0x172] sm:$0xff]
  %v10560 = vld [vmem:[%s196 + $0x1b2] sm:$0xff]
  %v10561 = vld [vmem:[%s196 + $0x1ba] sm:$0xff]
  %v10562 = vld [vmem:[%s196 + $0x1ca] sm:$0xff]
  %v10563 = vld [vmem:[%s196 + $0x1d2] sm:$0xff]
  %v10564 = vld [vmem:[%s196 + $0x1e2] sm:$0xff]
  %v10565 = vld [vmem:[%s196 + $0x1ea] sm:$0xff]
  %v10566 = vld [vmem:[%s196 + $0x1fa] sm:$0xff]
  %v10567 = vld [vmem:[%s196 + $0x202] sm:$0xff]
  %v10568 = vld [vmem:[%s196 + $0x212] sm:$0xff]
  %v10569 = vld [vmem:[%s196 + $0x21a] sm:$0xff]
  %v10570 = vld [vmem:[%s196 + $0x22a] sm:$0xff]
  %v10571 = vld [vmem:[%s196 + $0x232] sm:$0xff]
  %v10572 = vld [vmem:[%s196 + $0x242] sm:$0xff]
  %v10573 = vld [vmem:[%s196 + $0x24a] sm:$0xff]
  %v10574 = vld [vmem:[%s196 + $0x25a] sm:$0xff]
  %v10575 = vld [vmem:[%s196 + $0x262] sm:$0xff]
  %v10576 = vld [vmem:[%s196 + $0x272] sm:$0xff]
  %v10577 = vld [vmem:[%s196 + $0x27a] sm:$0xff]
  %v10578 = vld [vmem:[%s196 + $0x28a] sm:$0xff]
  %v10579 = vld [vmem:[%s196 + $0x292] sm:$0xff]
  %v10580 = vld [vmem:[%s196 + $0x2a2] sm:$0xff]
  %v10581 = vld [vmem:[%s196 + $0x2aa] sm:$0xff]
  %v10582 = vld [vmem:[%s196 + $0x2ba] sm:$0xff]
  %v10583 = vld [vmem:[%s196 + $0x2c2] sm:$0xff]
  %v10584 = vld [vmem:[%s196 + $0x2d2] sm:$0xff]
  %v10585 = vld [vmem:[%s196 + $0x2da] sm:$0xff]
  %v10586 = vld [vmem:[%s196 + $0x2ea] sm:$0xff]
  %v10587 = vld [vmem:[%s196 + $0x2f2] sm:$0xff]
  %v10588 = vld [vmem:[%s196 + $0x302] sm:$0xff]
  %v10589 = vld [vmem:[%s196 + $0x30a] sm:$0xff]
  %v10590 = vld [vmem:[%s196 + $0x31a] sm:$0xff]
  %v10591 = vld [vmem:[%s196 + $0x322] sm:$0xff]
  %v10593 = vsel %vm44, %v10528, 0
  %v10596 = vsel %vm44, %v10529, 0
  %v10599 = vsel %vm44, %v10530, 0
  %v10602 = vsel %vm44, %v10531, 0
  %v10605 = vsel %vm44, %v10532, 0
  %v10608 = vsel %vm44, %v10533, 0
  %v10611 = vsel %vm44, %v10534, 0
  %v10614 = vsel %vm44, %v10535, 0
  %v10617 = vsel %vm44, %v10536, 0
  %v10620 = vsel %vm44, %v10537, 0
  %v10623 = vsel %vm44, %v10538, 0
  %v10626 = vsel %vm44, %v10539, 0
  %v10629 = vsel %vm44, %v10540, 0
  %v10632 = vsel %vm44, %v10541, 0
  %v10635 = vsel %vm44, %v10542, 0
  %v10638 = vsel %vm44, %v10543, 0
  %v10641 = vsel %vm44, %v10544, 0
  %v10644 = vsel %vm44, %v10545, 0
  %v10647 = vsel %vm44, %v10546, 0
  %v10650 = vsel %vm44, %v10547, 0
  %v10653 = vsel %vm44, %v10548, 0
  %v10656 = vsel %vm44, %v10549, 0
  %v10659 = vsel %vm44, %v10550, 0
  %v10662 = vsel %vm44, %v10551, 0
  %v10665 = vsel %vm44, %v10552, 0
  %v10668 = vsel %vm44, %v10553, 0
  %v10671 = vsel %vm44, %v10554, 0
  %v10674 = vsel %vm44, %v10555, 0
  %v10677 = vsel %vm44, %v10556, 0
  %v10680 = vsel %vm44, %v10557, 0
  %v10683 = vsel %vm44, %v10558, 0
  %v10686 = vsel %vm44, %v10559, 0
  %v10689 = vsel %vm44, %v10560, 0
  %v10692 = vsel %vm44, %v10561, 0
  %v10695 = vsel %vm44, %v10562, 0
  %v10698 = vsel %vm44, %v10563, 0
  %v10701 = vsel %vm44, %v10564, 0
  %v10704 = vsel %vm44, %v10565, 0
  %v10707 = vsel %vm44, %v10566, 0
  %v10710 = vsel %vm44, %v10567, 0
  %v10713 = vsel %vm44, %v10568, 0
  %v10716 = vsel %vm44, %v10569, 0
  %v10719 = vsel %vm44, %v10570, 0
  %v10722 = vsel %vm44, %v10571, 0
  %v10725 = vsel %vm44, %v10572, 0
  %v10728 = vsel %vm44, %v10573, 0
  %v10731 = vsel %vm44, %v10574, 0
  %v10734 = vsel %vm44, %v10575, 0
  %v10737 = vsel %vm44, %v10576, 0
  %v10740 = vsel %vm44, %v10577, 0
  %v10743 = vsel %vm44, %v10578, 0
  %v10746 = vsel %vm44, %v10579, 0
  %v10749 = vsel %vm44, %v10580, 0
  %v10752 = vsel %vm44, %v10581, 0
  %v10755 = vsel %vm44, %v10582, 0
  %v10758 = vsel %vm44, %v10583, 0
  %v10761 = vsel %vm44, %v10584, 0
  %v10764 = vsel %vm44, %v10585, 0
  %v10767 = vsel %vm44, %v10586, 0
  %v10770 = vsel %vm44, %v10587, 0
  %v10773 = vsel %vm44, %v10588, 0
  %v10776 = vsel %vm44, %v10589, 0
  %v10779 = vsel %vm44, %v10590, 0
  %v10782 = vsel %vm44, %v10591, 0
  %v10785 = vsel %vm581, %v40, 0
  %10787 = vmatprep.subr.mxu0 0.0
  %10788 = vmatpush1.msra.mxu0 %v10785
  %10789 = vmatprep.subr.mxu0 0.0
  %10790 = vmatpush1.msra.mxu0 0.0
  %10791 = vmatprep.subr.mxu0 0.0
  %10792 = vmatpush1.msra.mxu0 0.0
  %10793 = vmatprep.subr.mxu0 0.0
  %10794 = vmatpush1.msra.mxu0 0.0
  %10795 = vmatprep.subr.mxu0 0.0
  %10796 = vmatpush1.msra.mxu0 0.0
  %10797 = vmatprep.subr.mxu0 0.0
  %10798 = vmatpush1.msra.mxu0 0.0
  %10799 = vmatprep.subr.mxu0 0.0
  %10800 = vmatpush1.msra.mxu0 0.0
  %10801 = vmatprep.subr.mxu0 0.0
  %10802 = vmatpush1.msra.mxu0 0.0
  %10803 = vmatprep.subr.mxu0 0.0
  %10804 = vmatpush1.msra.mxu0 0.0
  %10805 = vmatprep.subr.mxu0 0.0
  %10806 = vmatpush1.msra.mxu0 0.0
  %10807 = vmatprep.subr.mxu0 0.0
  %10808 = vmatpush1.msra.mxu0 0.0
  %10809 = vmatprep.subr.mxu0 0.0
  %10810 = vmatpush1.msra.mxu0 0.0
  %10811 = vmatprep.subr.mxu0 0.0
  %10812 = vmatpush1.msra.mxu0 0.0
  %10813 = vmatprep.subr.mxu0 0.0
  %10814 = vmatpush1.msra.mxu0 0.0
  %10815 = vmatprep.subr.mxu0 0.0
  %10816 = vmatpush1.msra.mxu0 0.0
  %10817 = vmatprep.subr.mxu0 0.0
  %10818 = vmatpush1.msra.mxu0 0.0
  %10819 = vmatprep.subr.mxu0 0.0
  %10820 = vmatpush1.msra.mxu0 0.0
  %10821 = vmatprep.subr.mxu0 0.0
  %10822 = vmatpush1.msra.mxu0 0.0
  %10823 = vmatprep.subr.mxu0 0.0
  %10824 = vmatpush1.msra.mxu0 0.0
  %10825 = vmatprep.subr.mxu0 0.0
  %10826 = vmatpush1.msra.mxu0 0.0
  %10827 = vmatprep.subr.mxu0 0.0
  %10828 = vmatpush1.msra.mxu0 0.0
  %10829 = vmatprep.subr.mxu0 0.0
  %10830 = vmatpush1.msra.mxu0 0.0
  %10831 = vmatprep.subr.mxu0 0.0
  %10832 = vmatpush1.msra.mxu0 0.0
  %10833 = vmatprep.subr.mxu0 0.0
  %10834 = vmatpush1.msra.mxu0 0.0
  %10835 = vmatprep.subr.mxu0 0.0
  %10836 = vmatpush1.msra.mxu0 0.0
  %10837 = vmatprep.subr.mxu0 0.0
  %10838 = vmatpush1.msra.mxu0 0.0
  %10839 = vmatprep.subr.mxu0 0.0
  %10840 = vmatpush1.msra.mxu0 0.0
  %10841 = vmatprep.subr.mxu0 0.0
  %10842 = vmatpush1.msra.mxu0 0.0
  %10843 = vmatprep.subr.mxu0 0.0
  %10844 = vmatpush1.msra.mxu0 0.0
  %10845 = vmatprep.subr.mxu0 0.0
  %10846 = vmatpush1.msra.mxu0 0.0
  %10847 = vmatprep.subr.mxu0 0.0
  %10848 = vmatpush1.msra.mxu0 0.0
  %10849 = vmatprep.subr.mxu0 0.0
  %10850 = vmatpush1.msra.mxu0 0.0
  %10851 = vmatprep.mubr.f32.mxu0 0.0
  %10852 = vmatmul.mubr.f32.gmra.mrb[0].mxu0 %v10593
  %v10853 = vpop.f32.mrb[0].mxu0
  %v10854 = vadd.f32 0.0, %v10853
  %v10855 = vpop.f32.mrb[0].mxu0
  %10856 = vmatprep.mubr.f32.mxu0 0.0
  %10857 = vmatmul.mubr.f32.gmra.mrb[0].mxu0 %v10596
  %v10858 = vpop.f32.mrb[0].mxu0
  %v10859 = vadd.f32 0.0, %v10858
  %v10860 = vpop.f32.mrb[0].mxu0
  %10861 = vmatprep.mubr.f32.mxu0 0.0
  %10862 = vmatmul.mubr.f32.gmra.mrb[0].mxu0 %v10599
  %v10863 = vpop.f32.mrb[0].mxu0
  %v10864 = vadd.f32 0.0, %v10863
  %v10865 = vpop.f32.mrb[0].mxu0
  %10866 = vmatprep.mubr.f32.mxu0 0.0
  %10867 = vmatmul.mubr.f32.gmra.mrb[0].mxu0 %v10602
  %v10868 = vpop.f32.mrb[0].mxu0
  %v10869 = vadd.f32 0.0, %v10868
  %v10870 = vpop.f32.mrb[0].mxu0
  %10871 = vmatprep.mubr.f32.mxu0 0.0
  %10872 = vmatmul.mubr.f32.gmra.mrb[0].mxu0 %v10605
  %v10873 = vpop.f32.mrb[0].mxu0
  %v10874 = vadd.f32 0.0, %v10873
  %v10875 = vpop.f32.mrb[0].mxu0
  %10876 = vmatprep.mubr.f32.mxu0 0.0
  %10877 = vmatmul.mubr.f32.gmra.mrb[0].mxu0 %v10608
  %v10878 = vpop.f32.mrb[0].mxu0
  %v10879 = vadd.f32 0.0, %v10878
  %v10880 = vpop.f32.mrb[0].mxu0
  %10881 = vmatprep.mubr.f32.mxu0 0.0
  %10882 = vmatmul.mubr.f32.gmra.mrb[0].mxu0 %v10611
  %v10883 = vpop.f32.mrb[0].mxu0
  %v10884 = vadd.f32 0.0, %v10883
  %v10885 = vpop.f32.mrb[0].mxu0
  %10886 = vmatprep.mubr.f32.mxu0 0.0
  %10887 = vmatmul.mubr.f32.gmra.mrb[0].mxu0 %v10614
  %v10888 = vpop.f32.mrb[0].mxu0
  %v10889 = vadd.f32 0.0, %v10888
  %v10890 = vpop.f32.mrb[0].mxu0
  %10891 = vmatprep.mubr.f32.mxu0 0.0
  %10892 = vmatmul.mubr.f32.gmra.mrb[0].mxu0 %v10617
  %v10893 = vpop.f32.mrb[0].mxu0
  %v10894 = vadd.f32 0.0, %v10893
  %v10895 = vpop.f32.mrb[0].mxu0
  %10896 = vmatprep.mubr.f32.mxu0 0.0
  %10897 = vmatmul.mubr.f32.gmra.mrb[0].mxu0 %v10620
  %v10898 = vpop.f32.mrb[0].mxu0
  %v10899 = vadd.f32 0.0, %v10898
  %v10900 = vpop.f32.mrb[0].mxu0
  %10901 = vmatprep.mubr.f32.mxu0 0.0
  %10902 = vmatmul.mubr.f32.gmra.mrb[0].mxu0 %v10623
  %v10903 = vpop.f32.mrb[0].mxu0
  %v10904 = vadd.f32 0.0, %v10903
  %v10905 = vpop.f32.mrb[0].mxu0
  %10906 = vmatprep.mubr.f32.mxu0 0.0
  %10907 = vmatmul.mubr.f32.gmra.mrb[0].mxu0 %v10626
  %v10908 = vpop.f32.mrb[0].mxu0
  %v10909 = vadd.f32 0.0, %v10908
  %v10910 = vpop.f32.mrb[0].mxu0
  %10911 = vmatprep.mubr.f32.mxu0 0.0
  %10912 = vmatmul.mubr.f32.gmra.mrb[0].mxu0 %v10629
  %v10913 = vpop.f32.mrb[0].mxu0
  %v10914 = vadd.f32 0.0, %v10913
  %v10915 = vpop.f32.mrb[0].mxu0
  %10916 = vmatprep.mubr.f32.mxu0 0.0
  %10917 = vmatmul.mubr.f32.gmra.mrb[0].mxu0 %v10632
  %v10918 = vpop.f32.mrb[0].mxu0
  %v10919 = vadd.f32 0.0, %v10918
  %v10920 = vpop.f32.mrb[0].mxu0
  %10921 = vmatprep.mubr.f32.mxu0 0.0
  %10922 = vmatmul.mubr.f32.gmra.mrb[0].mxu0 %v10635
  %v10923 = vpop.f32.mrb[0].mxu0
  %v10924 = vadd.f32 0.0, %v10923
  %v10925 = vpop.f32.mrb[0].mxu0
  %10926 = vmatprep.mubr.f32.mxu0 0.0
  %10927 = vmatmul.mubr.f32.gmra.mrb[0].mxu0 %v10638
  %v10928 = vpop.f32.mrb[0].mxu0
  %v10929 = vadd.f32 0.0, %v10928
  %v10930 = vpop.f32.mrb[0].mxu0
  %10931 = vmatprep.mubr.f32.mxu0 0.0
  %10932 = vmatmul.mubr.f32.gmra.mrb[0].mxu0 %v10641
  %v10933 = vpop.f32.mrb[0].mxu0
  %v10934 = vadd.f32 0.0, %v10933
  %v10935 = vpop.f32.mrb[0].mxu0
  %10936 = vmatprep.mubr.f32.mxu0 0.0
  %10937 = vmatmul.mubr.f32.gmra.mrb[0].mxu0 %v10644
  %v10938 = vpop.f32.mrb[0].mxu0
  %v10939 = vadd.f32 0.0, %v10938
  %v10940 = vpop.f32.mrb[0].mxu0
  %10941 = vmatprep.mubr.f32.mxu0 0.0
  %10942 = vmatmul.mubr.f32.gmra.mrb[0].mxu0 %v10647
  %v10943 = vpop.f32.mrb[0].mxu0
  %v10944 = vadd.f32 0.0, %v10943
  %v10945 = vpop.f32.mrb[0].mxu0
  %10946 = vmatprep.mubr.f32.mxu0 0.0
  %10947 = vmatmul.mubr.f32.gmra.mrb[0].mxu0 %v10650
  %v10948 = vpop.f32.mrb[0].mxu0
  %v10949 = vadd.f32 0.0, %v10948
  %v10950 = vpop.f32.mrb[0].mxu0
  %10951 = vmatprep.mubr.f32.mxu0 0.0
  %10952 = vmatmul.mubr.f32.gmra.mrb[0].mxu0 %v10653
  %v10953 = vpop.f32.mrb[0].mxu0
  %v10954 = vadd.f32 0.0, %v10953
  %v10955 = vpop.f32.mrb[0].mxu0
  %10956 = vmatprep.mubr.f32.mxu0 0.0
  %10957 = vmatmul.mubr.f32.gmra.mrb[0].mxu0 %v10656
  %v10958 = vpop.f32.mrb[0].mxu0
  %v10959 = vadd.f32 0.0, %v10958
  %v10960 = vpop.f32.mrb[0].mxu0
  %10961 = vmatprep.mubr.f32.mxu0 0.0
  %10962 = vmatmul.mubr.f32.gmra.mrb[0].mxu0 %v10659
  %v10963 = vpop.f32.mrb[0].mxu0
  %v10964 = vadd.f32 0.0, %v10963
  %v10965 = vpop.f32.mrb[0].mxu0
  %10966 = vmatprep.mubr.f32.mxu0 0.0
  %10967 = vmatmul.mubr.f32.gmra.mrb[0].mxu0 %v10662
  %v10968 = vpop.f32.mrb[0].mxu0
  %v10969 = vadd.f32 0.0, %v10968
  %v10970 = vpop.f32.mrb[0].mxu0
  %10971 = vmatprep.mubr.f32.mxu0 0.0
  %10972 = vmatmul.mubr.f32.gmra.mrb[0].mxu0 %v10665
  %v10973 = vpop.f32.mrb[0].mxu0
  %v10974 = vadd.f32 0.0, %v10973
  %v10975 = vpop.f32.mrb[0].mxu0
  %10976 = vmatprep.mubr.f32.mxu0 0.0
  %10977 = vmatmul.mubr.f32.gmra.mrb[0].mxu0 %v10668
  %v10978 = vpop.f32.mrb[0].mxu0
  %v10979 = vadd.f32 0.0, %v10978
  %v10980 = vpop.f32.mrb[0].mxu0
  %10981 = vmatprep.mubr.f32.mxu0 0.0
  %10982 = vmatmul.mubr.f32.gmra.mrb[0].mxu0 %v10671
  %v10983 = vpop.f32.mrb[0].mxu0
  %v10984 = vadd.f32 0.0, %v10983
  %v10985 = vpop.f32.mrb[0].mxu0
  %10986 = vmatprep.mubr.f32.mxu0 0.0
  %10987 = vmatmul.mubr.f32.gmra.mrb[0].mxu0 %v10674
  %v10988 = vpop.f32.mrb[0].mxu0
  %v10989 = vadd.f32 0.0, %v10988
  %v10990 = vpop.f32.mrb[0].mxu0
  %10991 = vmatprep.mubr.f32.mxu0 0.0
  %10992 = vmatmul.mubr.f32.gmra.mrb[0].mxu0 %v10677
  %v10993 = vpop.f32.mrb[0].mxu0
  %v10994 = vadd.f32 0.0, %v10993
  %v10995 = vpop.f32.mrb[0].mxu0
  %10996 = vmatprep.mubr.f32.mxu0 0.0
  %10997 = vmatmul.mubr.f32.gmra.mrb[0].mxu0 %v10680
  %v10998 = vpop.f32.mrb[0].mxu0
  %v10999 = vadd.f32 0.0, %v10998
  %v11000 = vpop.f32.mrb[0].mxu0
  %11001 = vmatprep.mubr.f32.mxu0 0.0
  %11002 = vmatmul.mubr.f32.gmra.mrb[0].mxu0 %v10683
  %v11003 = vpop.f32.mrb[0].mxu0
  %v11004 = vadd.f32 0.0, %v11003
  %v11005 = vpop.f32.mrb[0].mxu0
  %11006 = vmatprep.mubr.f32.mxu0 0.0
  %11007 = vmatmul.mubr.f32.gmra.mrb[0].mxu0 %v10686
  %v11008 = vpop.f32.mrb[0].mxu0
  %v11009 = vadd.f32 0.0, %v11008
  %v11010 = vpop.f32.mrb[0].mxu0
  %11011 = vmatprep.mubr.f32.mxu0 0.0
  %11012 = vmatmul.mubr.f32.gmra.mrb[0].mxu0 %v10689
  %v11013 = vpop.f32.mrb[0].mxu0
  %v11014 = vadd.f32 0.0, %v11013
  %v11015 = vpop.f32.mrb[0].mxu0
  %11016 = vmatprep.mubr.f32.mxu0 0.0
  %11017 = vmatmul.mubr.f32.gmra.mrb[0].mxu0 %v10692
  %v11018 = vpop.f32.mrb[0].mxu0
  %v11019 = vadd.f32 0.0, %v11018
  %v11020 = vpop.f32.mrb[0].mxu0
  %11021 = vmatprep.mubr.f32.mxu0 0.0
  %11022 = vmatmul.mubr.f32.gmra.mrb[0].mxu0 %v10695
  %v11023 = vpop.f32.mrb[0].mxu0
  %v11024 = vadd.f32 0.0, %v11023
  %v11025 = vpop.f32.mrb[0].mxu0
  %11026 = vmatprep.mubr.f32.mxu0 0.0
  %11027 = vmatmul.mubr.f32.gmra.mrb[0].mxu0 %v10698
  %v11028 = vpop.f32.mrb[0].mxu0
  %v11029 = vadd.f32 0.0, %v11028
  %v11030 = vpop.f32.mrb[0].mxu0
  %11031 = vmatprep.mubr.f32.mxu0 0.0
  %11032 = vmatmul.mubr.f32.gmra.mrb[0].mxu0 %v10701
  %v11033 = vpop.f32.mrb[0].mxu0
  %v11034 = vadd.f32 0.0, %v11033
  %v11035 = vpop.f32.mrb[0].mxu0
  %11036 = vmatprep.mubr.f32.mxu0 0.0
  %11037 = vmatmul.mubr.f32.gmra.mrb[0].mxu0 %v10704
  %v11038 = vpop.f32.mrb[0].mxu0
  %v11039 = vadd.f32 0.0, %v11038
  %v11040 = vpop.f32.mrb[0].mxu0
  %11041 = vmatprep.mubr.f32.mxu0 0.0
  %11042 = vmatmul.mubr.f32.gmra.mrb[0].mxu0 %v10707
  %v11043 = vpop.f32.mrb[0].mxu0
  %v11044 = vadd.f32 0.0, %v11043
  %v11045 = vpop.f32.mrb[0].mxu0
  %11046 = vmatprep.mubr.f32.mxu0 0.0
  %11047 = vmatmul.mubr.f32.gmra.mrb[0].mxu0 %v10710
  %v11048 = vpop.f32.mrb[0].mxu0
  %v11049 = vadd.f32 0.0, %v11048
  %v11050 = vpop.f32.mrb[0].mxu0
  %11051 = vmatprep.mubr.f32.mxu0 0.0
  %11052 = vmatmul.mubr.f32.gmra.mrb[0].mxu0 %v10713
  %v11053 = vpop.f32.mrb[0].mxu0
  %v11054 = vadd.f32 0.0, %v11053
  %v11055 = vpop.f32.mrb[0].mxu0
  %11056 = vmatprep.mubr.f32.mxu0 0.0
  %11057 = vmatmul.mubr.f32.gmra.mrb[0].mxu0 %v10716
  %v11058 = vpop.f32.mrb[0].mxu0
  %v11059 = vadd.f32 0.0, %v11058
  %v11060 = vpop.f32.mrb[0].mxu0
  %11061 = vmatprep.mubr.f32.mxu0 0.0
  %11062 = vmatmul.mubr.f32.gmra.mrb[0].mxu0 %v10719
  %v11063 = vpop.f32.mrb[0].mxu0
  %v11064 = vadd.f32 0.0, %v11063
  %v11065 = vpop.f32.mrb[0].mxu0
  %11066 = vmatprep.mubr.f32.mxu0 0.0
  %11067 = vmatmul.mubr.f32.gmra.mrb[0].mxu0 %v10722
  %v11068 = vpop.f32.mrb[0].mxu0
  %v11069 = vadd.f32 0.0, %v11068
  %v11070 = vpop.f32.mrb[0].mxu0
  %11071 = vmatprep.mubr.f32.mxu0 0.0
  %11072 = vmatmul.mubr.f32.gmra.mrb[0].mxu0 %v10725
  %v11073 = vpop.f32.mrb[0].mxu0
  %v11074 = vadd.f32 0.0, %v11073
  %v11075 = vpop.f32.mrb[0].mxu0
  %11076 = vmatprep.mubr.f32.mxu0 0.0
  %11077 = vmatmul.mubr.f32.gmra.mrb[0].mxu0 %v10728
  %v11078 = vpop.f32.mrb[0].mxu0
  %v11079 = vadd.f32 0.0, %v11078
  %v11080 = vpop.f32.mrb[0].mxu0
  %11081 = vmatprep.mubr.f32.mxu0 0.0
  %11082 = vmatmul.mubr.f32.gmra.mrb[0].mxu0 %v10731
  %v11083 = vpop.f32.mrb[0].mxu0
  %v11084 = vadd.f32 0.0, %v11083
  %v11085 = vpop.f32.mrb[0].mxu0
  %11086 = vmatprep.mubr.f32.mxu0 0.0
  %11087 = vmatmul.mubr.f32.gmra.mrb[0].mxu0 %v10734
  %v11088 = vpop.f32.mrb[0].mxu0
  %v11089 = vadd.f32 0.0, %v11088
  %v11090 = vpop.f32.mrb[0].mxu0
  %11091 = vmatprep.mubr.f32.mxu0 0.0
  %11092 = vmatmul.mubr.f32.gmra.mrb[0].mxu0 %v10737
  %v11093 = vpop.f32.mrb[0].mxu0
  %v11094 = vadd.f32 0.0, %v11093
  %v11095 = vpop.f32.mrb[0].mxu0
  %11096 = vmatprep.mubr.f32.mxu0 0.0
  %11097 = vmatmul.mubr.f32.gmra.mrb[0].mxu0 %v10740
  %v11098 = vpop.f32.mrb[0].mxu0
  %v11099 = vadd.f32 0.0, %v11098
  %v11100 = vpop.f32.mrb[0].mxu0
  %11101 = vmatprep.mubr.f32.mxu0 0.0
  %11102 = vmatmul.mubr.f32.gmra.mrb[0].mxu0 %v10743
  %v11103 = vpop.f32.mrb[0].mxu0
  %v11104 = vadd.f32 0.0, %v11103
  %v11105 = vpop.f32.mrb[0].mxu0
  %11106 = vmatprep.mubr.f32.mxu0 0.0
  %11107 = vmatmul.mubr.f32.gmra.mrb[0].mxu0 %v10746
  %v11108 = vpop.f32.mrb[0].mxu0
  %v11109 = vadd.f32 0.0, %v11108
  %v11110 = vpop.f32.mrb[0].mxu0
  %11111 = vmatprep.mubr.f32.mxu0 0.0
  %11112 = vmatmul.mubr.f32.gmra.mrb[0].mxu0 %v10749
  %v11113 = vpop.f32.mrb[0].mxu0
  %v11114 = vadd.f32 0.0, %v11113
  %v11115 = vpop.f32.mrb[0].mxu0
  %11116 = vmatprep.mubr.f32.mxu0 0.0
  %11117 = vmatmul.mubr.f32.gmra.mrb[0].mxu0 %v10752
  %v11118 = vpop.f32.mrb[0].mxu0
  %v11119 = vadd.f32 0.0, %v11118
  %v11120 = vpop.f32.mrb[0].mxu0
  %11121 = vmatprep.mubr.f32.mxu0 0.0
  %11122 = vmatmul.mubr.f32.gmra.mrb[0].mxu0 %v10755
  %v11123 = vpop.f32.mrb[0].mxu0
  %v11124 = vadd.f32 0.0, %v11123
  %v11125 = vpop.f32.mrb[0].mxu0
  %11126 = vmatprep.mubr.f32.mxu0 0.0
  %11127 = vmatmul.mubr.f32.gmra.mrb[0].mxu0 %v10758
  %v11128 = vpop.f32.mrb[0].mxu0
  %v11129 = vadd.f32 0.0, %v11128
  %v11130 = vpop.f32.mrb[0].mxu0
  %11131 = vmatprep.mubr.f32.mxu0 0.0
  %11132 = vmatmul.mubr.f32.gmra.mrb[0].mxu0 %v10761
  %v11133 = vpop.f32.mrb[0].mxu0
  %v11134 = vadd.f32 0.0, %v11133
  %v11135 = vpop.f32.mrb[0].mxu0
  %11136 = vmatprep.mubr.f32.mxu0 0.0
  %11137 = vmatmul.mubr.f32.gmra.mrb[0].mxu0 %v10764
  %v11138 = vpop.f32.mrb[0].mxu0
  %v11139 = vadd.f32 0.0, %v11138
  %v11140 = vpop.f32.mrb[0].mxu0
  %11141 = vmatprep.mubr.f32.mxu0 0.0
  %11142 = vmatmul.mubr.f32.gmra.mrb[0].mxu0 %v10767
  %v11143 = vpop.f32.mrb[0].mxu0
  %v11144 = vadd.f32 0.0, %v11143
  %v11145 = vpop.f32.mrb[0].mxu0
  %11146 = vmatprep.mubr.f32.mxu0 0.0
  %11147 = vmatmul.mubr.f32.gmra.mrb[0].mxu0 %v10770
  %v11148 = vpop.f32.mrb[0].mxu0
  %v11149 = vadd.f32 0.0, %v11148
  %v11150 = vpop.f32.mrb[0].mxu0
  %11151 = vmatprep.mubr.f32.mxu0 0.0
  %11152 = vmatmul.mubr.f32.gmra.mrb[0].mxu0 %v10773
  %v11153 = vpop.f32.mrb[0].mxu0
  %v11154 = vadd.f32 0.0, %v11153
  %v11155 = vpop.f32.mrb[0].mxu0
  %11156 = vmatprep.mubr.f32.mxu0 0.0
  %11157 = vmatmul.mubr.f32.gmra.mrb[0].mxu0 %v10776
  %v11158 = vpop.f32.mrb[0].mxu0
  %v11159 = vadd.f32 0.0, %v11158
  %v11160 = vpop.f32.mrb[0].mxu0
  %11161 = vmatprep.mubr.f32.mxu0 0.0
  %11162 = vmatmul.mubr.f32.gmra.mrb[0].mxu0 %v10779
  %v11163 = vpop.f32.mrb[0].mxu0
  %v11164 = vadd.f32 0.0, %v11163
  %v11165 = vpop.f32.mrb[0].mxu0
  %11166 = vmatprep.mubr.f32.mxu0 0.0
  %11167 = vmatmul.mubr.f32.gmra.mrb[0].mxu0 %v10782
  %v11168 = vpop.f32.mrb[0].mxu0
  %v11169 = vadd.f32 0.0, %v11168
  %v11170 = vpop.f32.mrb[0].mxu0
  %11171 = vdwg.mxu0
  %v11172 = vadd.f32 %v10464, %v10854
  %v11173 = vadd.f32 %v10465, %v10859
  %v11174 = vadd.f32 %v10466, %v10864
  %v11175 = vadd.f32 %v10467, %v10869
  %v11176 = vadd.f32 %v10468, %v10874
  %v11177 = vadd.f32 %v10469, %v10879
  %v11178 = vadd.f32 %v10470, %v10884
  %v11179 = vadd.f32 %v10471, %v10889
  %v11180 = vadd.f32 %v10472, %v10894
  %v11181 = vadd.f32 %v10473, %v10899
  %v11182 = vadd.f32 %v10474, %v10904
  %v11183 = vadd.f32 %v10475, %v10909
  %v11184 = vadd.f32 %v10476, %v10914
  %v11185 = vadd.f32 %v10477, %v10919
  %v11186 = vadd.f32 %v10478, %v10924
  %v11187 = vadd.f32 %v10479, %v10929
  %v11188 = vadd.f32 %v10480, %v10934
  %v11189 = vadd.f32 %v10481, %v10939
  %v11190 = vadd.f32 %v10482, %v10944
  %v11191 = vadd.f32 %v10483, %v10949
  %v11192 = vadd.f32 %v10484, %v10954
  %v11193 = vadd.f32 %v10485, %v10959
  %v11194 = vadd.f32 %v10486, %v10964
  %v11195 = vadd.f32 %v10487, %v10969
  %v11196 = vadd.f32 %v10488, %v10974
  %v11197 = vadd.f32 %v10489, %v10979
  %v11198 = vadd.f32 %v10490, %v10984
  %v11199 = vadd.f32 %v10491, %v10989
  %v11200 = vadd.f32 %v10492, %v10994
  %v11201 = vadd.f32 %v10493, %v10999
  %v11202 = vadd.f32 %v10494, %v11004
  %v11203 = vadd.f32 %v10495, %v11009
  %v11204 = vadd.f32 %v10496, %v11014
  %v11205 = vadd.f32 %v10497, %v11019
  %v11206 = vadd.f32 %v10498, %v11024
  %v11207 = vadd.f32 %v10499, %v11029
  %v11208 = vadd.f32 %v10500, %v11034
  %v11209 = vadd.f32 %v10501, %v11039
  %v11210 = vadd.f32 %v10502, %v11044
  %v11211 = vadd.f32 %v10503, %v11049
  %v11212 = vadd.f32 %v10504, %v11054
  %v11213 = vadd.f32 %v10505, %v11059
  %v11214 = vadd.f32 %v10506, %v11064
  %v11215 = vadd.f32 %v10507, %v11069
  %v11216 = vadd.f32 %v10508, %v11074
  %v11217 = vadd.f32 %v10509, %v11079
  %v11218 = vadd.f32 %v10510, %v11084
  %v11219 = vadd.f32 %v10511, %v11089
  %v11220 = vadd.f32 %v10512, %v11094
  %v11221 = vadd.f32 %v10513, %v11099
  %v11222 = vadd.f32 %v10514, %v11104
  %v11223 = vadd.f32 %v10515, %v11109
  %v11224 = vadd.f32 %v10516, %v11114
  %v11225 = vadd.f32 %v10517, %v11119
  %v11226 = vadd.f32 %v10518, %v11124
  %v11227 = vadd.f32 %v10519, %v11129
  %v11228 = vadd.f32 %v10520, %v11134
  %v11229 = vadd.f32 %v10521, %v11139
  %v11230 = vadd.f32 %v10522, %v11144
  %v11231 = vadd.f32 %v10523, %v11149
  %v11232 = vadd.f32 %v10524, %v11154
  %v11233 = vadd.f32 %v10525, %v11159
  %v11234 = vadd.f32 %v10526, %v11164
  %v11235 = vadd.f32 %v10527, %v11169
  %v11236 = vld [vmem:[%s4382] sm:$0xff]
  %v11237 = vld [vmem:[%s4382 + $0x8] sm:$0xff]
  %v11238 = vld [vmem:[%s4382 + $0x18] sm:$0xff]
  %v11239 = vld [vmem:[%s4382 + $0x20] sm:$0xff]
  %v11240 = vld [vmem:[%s4382 + $0x30] sm:$0xff]
  %v11241 = vld [vmem:[%s4382 + $0x38] sm:$0xff]
  %v11242 = vld [vmem:[%s4382 + $0x48] sm:$0xff]
  %v11243 = vld [vmem:[%s4382 + $0x50] sm:$0xff]
  %v11244 = vld [vmem:[%s4382 + $0x60] sm:$0xff]
  %v11245 = vld [vmem:[%s4382 + $0x68] sm:$0xff]
  %v11246 = vld [vmem:[%s4382 + $0x78] sm:$0xff]
  %v11247 = vld [vmem:[%s4382 + $0x80] sm:$0xff]
  %v11248 = vld [vmem:[%s4382 + $0x90] sm:$0xff]
  %v11249 = vld [vmem:[%s4382 + $0x98] sm:$0xff]
  %v11250 = vld [vmem:[%s4382 + $0xa8] sm:$0xff]
  %v11251 = vld [vmem:[%s4382 + $0xb0] sm:$0xff]
  %v11252 = vld [vmem:[%s4382 + $0xc0] sm:$0xff]
  %v11253 = vld [vmem:[%s4382 + $0xc8] sm:$0xff]
  %v11254 = vld [vmem:[%s4382 + $0xd8] sm:$0xff]
  %v11255 = vld [vmem:[%s4382 + $0xe0] sm:$0xff]
  %v11256 = vld [vmem:[%s4382 + $0xf0] sm:$0xff]
  %v11257 = vld [vmem:[%s4382 + $0xf8] sm:$0xff]
  %v11258 = vld [vmem:[%s4382 + $0x108] sm:$0xff]
  %v11259 = vld [vmem:[%s4382 + $0x110] sm:$0xff]
  %v11260 = vld [vmem:[%s4382 + $0x120] sm:$0xff]
  %v11261 = vld [vmem:[%s4382 + $0x128] sm:$0xff]
  %v11262 = vld [vmem:[%s4382 + $0x138] sm:$0xff]
  %v11263 = vld [vmem:[%s4382 + $0x140] sm:$0xff]
  %v11264 = vld [vmem:[%s4382 + $0x150] sm:$0xff]
  %v11265 = vld [vmem:[%s4382 + $0x158] sm:$0xff]
  %v11266 = vld [vmem:[%s4382 + $0x168] sm:$0xff]
  %v11267 = vld [vmem:[%s4382 + $0x170] sm:$0xff]
  %v11268 = vld [vmem:[%s4382 + $0x1b0] sm:$0xff]
  %v11269 = vld [vmem:[%s4382 + $0x1b8] sm:$0xff]
  %v11270 = vld [vmem:[%s4382 + $0x1c8] sm:$0xff]
  %v11271 = vld [vmem:[%s4382 + $0x1d0] sm:$0xff]
  %v11272 = vld [vmem:[%s4382 + $0x1e0] sm:$0xff]
  %v11273 = vld [vmem:[%s4382 + $0x1e8] sm:$0xff]
  %v11274 = vld [vmem:[%s4382 + $0x1f8] sm:$0xff]
  %v11275 = vld [vmem:[%s4382 + $0x200] sm:$0xff]
  %v11276 = vld [vmem:[%s4382 + $0x210] sm:$0xff]
  %v11277 = vld [vmem:[%s4382 + $0x218] sm:$0xff]
  %v11278 = vld [vmem:[%s4382 + $0x228] sm:$0xff]
  %v11279 = vld [vmem:[%s4382 + $0x230] sm:$0xff]
  %v11280 = vld [vmem:[%s4382 + $0x240] sm:$0xff]
  %v11281 = vld [vmem:[%s4382 + $0x248] sm:$0xff]
  %v11282 = vld [vmem:[%s4382 + $0x258] sm:$0xff]
  %v11283 = vld [vmem:[%s4382 + $0x260] sm:$0xff]
  %v11284 = vld [vmem:[%s4382 + $0x270] sm:$0xff]
  %v11285 = vld [vmem:[%s4382 + $0x278] sm:$0xff]
  %v11286 = vld [vmem:[%s4382 + $0x288] sm:$0xff]
  %v11287 = vld [vmem:[%s4382 + $0x290] sm:$0xff]
  %v11288 = vld [vmem:[%s4382 + $0x2a0] sm:$0xff]
  %v11289 = vld [vmem:[%s4382 + $0x2a8] sm:$0xff]
  %v11290 = vld [vmem:[%s4382 + $0x2b8] sm:$0xff]
  %v11291 = vld [vmem:[%s4382 + $0x2c0] sm:$0xff]
  %v11292 = vld [vmem:[%s4382 + $0x2d0] sm:$0xff]
  %v11293 = vld [vmem:[%s4382 + $0x2d8] sm:$0xff]
  %v11294 = vld [vmem:[%s4382 + $0x2e8] sm:$0xff]
  %v11295 = vld [vmem:[%s4382 + $0x2f0] sm:$0xff]
  %v11296 = vld [vmem:[%s4382 + $0x300] sm:$0xff]
  %v11297 = vld [vmem:[%s4382 + $0x308] sm:$0xff]
  %v11298 = vld [vmem:[%s4382 + $0x318] sm:$0xff]
  %v11299 = vld [vmem:[%s4382 + $0x320] sm:$0xff]
  %v11301 = vsel %vm44, %v11236, 0
  %v11304 = vsel %vm44, %v11237, 0
  %v11307 = vsel %vm44, %v11238, 0
  %v11310 = vsel %vm44, %v11239, 0
  %v11313 = vsel %vm44, %v11240, 0
  %v11316 = vsel %vm44, %v11241, 0
  %v11319 = vsel %vm44, %v11242, 0
  %v11322 = vsel %vm44, %v11243, 0
  %v11325 = vsel %vm44, %v11244, 0
  %v11328 = vsel %vm44, %v11245, 0
  %v11331 = vsel %vm44, %v11246, 0
  %v11334 = vsel %vm44, %v11247, 0
  %v11337 = vsel %vm44, %v11248, 0
  %v11340 = vsel %vm44, %v11249, 0
  %v11343 = vsel %vm44, %v11250, 0
  %v11346 = vsel %vm44, %v11251, 0
  %v11349 = vsel %vm44, %v11252, 0
  %v11352 = vsel %vm44, %v11253, 0
  %v11355 = vsel %vm44, %v11254, 0
  %v11358 = vsel %vm44, %v11255, 0
  %v11361 = vsel %vm44, %v11256, 0
  %v11364 = vsel %vm44, %v11257, 0
  %v11367 = vsel %vm44, %v11258, 0
  %v11370 = vsel %vm44, %v11259, 0
  %v11373 = vsel %vm44, %v11260, 0
  %v11376 = vsel %vm44, %v11261, 0
  %v11379 = vsel %vm44, %v11262, 0
  %v11382 = vsel %vm44, %v11263, 0
  %v11385 = vsel %vm44, %v11264, 0
  %v11388 = vsel %vm44, %v11265, 0
  %v11391 = vsel %vm44, %v11266, 0
  %v11394 = vsel %vm44, %v11267, 0
  %v11397 = vsel %vm44, %v11268, 0
  %v11400 = vsel %vm44, %v11269, 0
  %v11403 = vsel %vm44, %v11270, 0
  %v11406 = vsel %vm44, %v11271, 0
  %v11409 = vsel %vm44, %v11272, 0
  %v11412 = vsel %vm44, %v11273, 0
  %v11415 = vsel %vm44, %v11274, 0
  %v11418 = vsel %vm44, %v11275, 0
  %v11421 = vsel %vm44, %v11276, 0
  %v11424 = vsel %vm44, %v11277, 0
  %v11427 = vsel %vm44, %v11278, 0
  %v11430 = vsel %vm44, %v11279, 0
  %v11433 = vsel %vm44, %v11280, 0
  %v11436 = vsel %vm44, %v11281, 0
  %v11439 = vsel %vm44, %v11282, 0
  %v11442 = vsel %vm44, %v11283, 0
  %v11445 = vsel %vm44, %v11284, 0
  %v11448 = vsel %vm44, %v11285, 0
  %v11451 = vsel %vm44, %v11286, 0
  %v11454 = vsel %vm44, %v11287, 0
  %v11457 = vsel %vm44, %v11288, 0
  %v11460 = vsel %vm44, %v11289, 0
  %v11463 = vsel %vm44, %v11290, 0
  %v11466 = vsel %vm44, %v11291, 0
  %v11469 = vsel %vm44, %v11292, 0
  %v11472 = vsel %vm44, %v11293, 0
  %v11475 = vsel %vm44, %v11294, 0
  %v11478 = vsel %vm44, %v11295, 0
  %v11481 = vsel %vm44, %v11296, 0
  %v11484 = vsel %vm44, %v11297, 0
  %v11487 = vsel %vm44, %v11298, 0
  %v11490 = vsel %vm44, %v11299, 0
  %v11493 = vsel %vm581, %v41, 0
  %11495 = vmatprep.subr.mxu0 0.0
  %11496 = vmatpush1.msra.mxu0 %v11493
  %11497 = vmatprep.subr.mxu0 0.0
  %11498 = vmatpush1.msra.mxu0 0.0
  %11499 = vmatprep.subr.mxu0 0.0
  %11500 = vmatpush1.msra.mxu0 0.0
  %11501 = vmatprep.subr.mxu0 0.0
  %11502 = vmatpush1.msra.mxu0 0.0
  %11503 = vmatprep.subr.mxu0 0.0
  %11504 = vmatpush1.msra.mxu0 0.0
  %11505 = vmatprep.subr.mxu0 0.0
  %11506 = vmatpush1.msra.mxu0 0.0
  %11507 = vmatprep.subr.mxu0 0.0
  %11508 = vmatpush1.msra.mxu0 0.0
  %11509 = vmatprep.subr.mxu0 0.0
  %11510 = vmatpush1.msra.mxu0 0.0
  %11511 = vmatprep.subr.mxu0 0.0
  %11512 = vmatpush1.msra.mxu0 0.0
  %11513 = vmatprep.subr.mxu0 0.0
  %11514 = vmatpush1.msra.mxu0 0.0
  %11515 = vmatprep.subr.mxu0 0.0
  %11516 = vmatpush1.msra.mxu0 0.0
  %11517 = vmatprep.subr.mxu0 0.0
  %11518 = vmatpush1.msra.mxu0 0.0
  %11519 = vmatprep.subr.mxu0 0.0
  %11520 = vmatpush1.msra.mxu0 0.0
  %11521 = vmatprep.subr.mxu0 0.0
  %11522 = vmatpush1.msra.mxu0 0.0
  %11523 = vmatprep.subr.mxu0 0.0
  %11524 = vmatpush1.msra.mxu0 0.0
  %11525 = vmatprep.subr.mxu0 0.0
  %11526 = vmatpush1.msra.mxu0 0.0
  %11527 = vmatprep.subr.mxu0 0.0
  %11528 = vmatpush1.msra.mxu0 0.0
  %11529 = vmatprep.subr.mxu0 0.0
  %11530 = vmatpush1.msra.mxu0 0.0
  %11531 = vmatprep.subr.mxu0 0.0
  %11532 = vmatpush1.msra.mxu0 0.0
  %11533 = vmatprep.subr.mxu0 0.0
  %11534 = vmatpush1.msra.mxu0 0.0
  %11535 = vmatprep.subr.mxu0 0.0
  %11536 = vmatpush1.msra.mxu0 0.0
  %11537 = vmatprep.subr.mxu0 0.0
  %11538 = vmatpush1.msra.mxu0 0.0
  %11539 = vmatprep.subr.mxu0 0.0
  %11540 = vmatpush1.msra.mxu0 0.0
  %11541 = vmatprep.subr.mxu0 0.0
  %11542 = vmatpush1.msra.mxu0 0.0
  %11543 = vmatprep.subr.mxu0 0.0
  %11544 = vmatpush1.msra.mxu0 0.0
  %11545 = vmatprep.subr.mxu0 0.0
  %11546 = vmatpush1.msra.mxu0 0.0
  %11547 = vmatprep.subr.mxu0 0.0
  %11548 = vmatpush1.msra.mxu0 0.0
  %11549 = vmatprep.subr.mxu0 0.0
  %11550 = vmatpush1.msra.mxu0 0.0
  %11551 = vmatprep.subr.mxu0 0.0
  %11552 = vmatpush1.msra.mxu0 0.0
  %11553 = vmatprep.subr.mxu0 0.0
  %11554 = vmatpush1.msra.mxu0 0.0
  %11555 = vmatprep.subr.mxu0 0.0
  %11556 = vmatpush1.msra.mxu0 0.0
  %11557 = vmatprep.subr.mxu0 0.0
  %11558 = vmatpush1.msra.mxu0 0.0
  %11559 = vmatprep.mubr.f32.mxu0 0.0
  %11560 = vmatmul.mubr.f32.gmra.mrb[0].mxu0 %v11301
  %v11561 = vpop.f32.mrb[0].mxu0
  %v11562 = vadd.f32 0.0, %v11561
  %v11563 = vpop.f32.mrb[0].mxu0
  %11564 = vmatprep.mubr.f32.mxu0 0.0
  %11565 = vmatmul.mubr.f32.gmra.mrb[0].mxu0 %v11304
  %v11566 = vpop.f32.mrb[0].mxu0
  %v11567 = vadd.f32 0.0, %v11566
  %v11568 = vpop.f32.mrb[0].mxu0
  %11569 = vmatprep.mubr.f32.mxu0 0.0
  %11570 = vmatmul.mubr.f32.gmra.mrb[0].mxu0 %v11307
  %v11571 = vpop.f32.mrb[0].mxu0
  %v11572 = vadd.f32 0.0, %v11571
  %v11573 = vpop.f32.mrb[0].mxu0
  %11574 = vmatprep.mubr.f32.mxu0 0.0
  %11575 = vmatmul.mubr.f32.gmra.mrb[0].mxu0 %v11310
  %v11576 = vpop.f32.mrb[0].mxu0
  %v11577 = vadd.f32 0.0, %v11576
  %v11578 = vpop.f32.mrb[0].mxu0
  %11579 = vmatprep.mubr.f32.mxu0 0.0
  %11580 = vmatmul.mubr.f32.gmra.mrb[0].mxu0 %v11313
  %v11581 = vpop.f32.mrb[0].mxu0
  %v11582 = vadd.f32 0.0, %v11581
  %v11583 = vpop.f32.mrb[0].mxu0
  %11584 = vmatprep.mubr.f32.mxu0 0.0
  %11585 = vmatmul.mubr.f32.gmra.mrb[0].mxu0 %v11316
  %v11586 = vpop.f32.mrb[0].mxu0
  %v11587 = vadd.f32 0.0, %v11586
  %v11588 = vpop.f32.mrb[0].mxu0
  %11589 = vmatprep.mubr.f32.mxu0 0.0
  %11590 = vmatmul.mubr.f32.gmra.mrb[0].mxu0 %v11319
  %v11591 = vpop.f32.mrb[0].mxu0
  %v11592 = vadd.f32 0.0, %v11591
  %v11593 = vpop.f32.mrb[0].mxu0
  %11594 = vmatprep.mubr.f32.mxu0 0.0
  %11595 = vmatmul.mubr.f32.gmra.mrb[0].mxu0 %v11322
  %v11596 = vpop.f32.mrb[0].mxu0
  %v11597 = vadd.f32 0.0, %v11596
  %v11598 = vpop.f32.mrb[0].mxu0
  %11599 = vmatprep.mubr.f32.mxu0 0.0
  %11600 = vmatmul.mubr.f32.gmra.mrb[0].mxu0 %v11325
  %v11601 = vpop.f32.mrb[0].mxu0
  %v11602 = vadd.f32 0.0, %v11601
  %v11603 = vpop.f32.mrb[0].mxu0
  %11604 = vmatprep.mubr.f32.mxu0 0.0
  %11605 = vmatmul.mubr.f32.gmra.mrb[0].mxu0 %v11328
  %v11606 = vpop.f32.mrb[0].mxu0
  %v11607 = vadd.f32 0.0, %v11606
  %v11608 = vpop.f32.mrb[0].mxu0
  %11609 = vmatprep.mubr.f32.mxu0 0.0
  %11610 = vmatmul.mubr.f32.gmra.mrb[0].mxu0 %v11331
  %v11611 = vpop.f32.mrb[0].mxu0
  %v11612 = vadd.f32 0.0, %v11611
  %v11613 = vpop.f32.mrb[0].mxu0
  %11614 = vmatprep.mubr.f32.mxu0 0.0
  %11615 = vmatmul.mubr.f32.gmra.mrb[0].mxu0 %v11334
  %v11616 = vpop.f32.mrb[0].mxu0
  %v11617 = vadd.f32 0.0, %v11616
  %v11618 = vpop.f32.mrb[0].mxu0
  %11619 = vmatprep.mubr.f32.mxu0 0.0
  %11620 = vmatmul.mubr.f32.gmra.mrb[0].mxu0 %v11337
  %v11621 = vpop.f32.mrb[0].mxu0
  %v11622 = vadd.f32 0.0, %v11621
  %v11623 = vpop.f32.mrb[0].mxu0
  %11624 = vmatprep.mubr.f32.mxu0 0.0
  %11625 = vmatmul.mubr.f32.gmra.mrb[0].mxu0 %v11340
  %v11626 = vpop.f32.mrb[0].mxu0
  %v11627 = vadd.f32 0.0, %v11626
  %v11628 = vpop.f32.mrb[0].mxu0
  %11629 = vmatprep.mubr.f32.mxu0 0.0
  %11630 = vmatmul.mubr.f32.gmra.mrb[0].mxu0 %v11343
  %v11631 = vpop.f32.mrb[0].mxu0
  %v11632 = vadd.f32 0.0, %v11631
  %v11633 = vpop.f32.mrb[0].mxu0
  %11634 = vmatprep.mubr.f32.mxu0 0.0
  %11635 = vmatmul.mubr.f32.gmra.mrb[0].mxu0 %v11346
  %v11636 = vpop.f32.mrb[0].mxu0
  %v11637 = vadd.f32 0.0, %v11636
  %v11638 = vpop.f32.mrb[0].mxu0
  %11639 = vmatprep.mubr.f32.mxu0 0.0
  %11640 = vmatmul.mubr.f32.gmra.mrb[0].mxu0 %v11349
  %v11641 = vpop.f32.mrb[0].mxu0
  %v11642 = vadd.f32 0.0, %v11641
  %v11643 = vpop.f32.mrb[0].mxu0
  %11644 = vmatprep.mubr.f32.mxu0 0.0
  %11645 = vmatmul.mubr.f32.gmra.mrb[0].mxu0 %v11352
  %v11646 = vpop.f32.mrb[0].mxu0
  %v11647 = vadd.f32 0.0, %v11646
  %v11648 = vpop.f32.mrb[0].mxu0
  %11649 = vmatprep.mubr.f32.mxu0 0.0
  %11650 = vmatmul.mubr.f32.gmra.mrb[0].mxu0 %v11355
  %v11651 = vpop.f32.mrb[0].mxu0
  %v11652 = vadd.f32 0.0, %v11651
  %v11653 = vpop.f32.mrb[0].mxu0
  %11654 = vmatprep.mubr.f32.mxu0 0.0
  %11655 = vmatmul.mubr.f32.gmra.mrb[0].mxu0 %v11358
  %v11656 = vpop.f32.mrb[0].mxu0
  %v11657 = vadd.f32 0.0, %v11656
  %v11658 = vpop.f32.mrb[0].mxu0
  %11659 = vmatprep.mubr.f32.mxu0 0.0
  %11660 = vmatmul.mubr.f32.gmra.mrb[0].mxu0 %v11361
  %v11661 = vpop.f32.mrb[0].mxu0
  %v11662 = vadd.f32 0.0, %v11661
  %v11663 = vpop.f32.mrb[0].mxu0
  %11664 = vmatprep.mubr.f32.mxu0 0.0
  %11665 = vmatmul.mubr.f32.gmra.mrb[0].mxu0 %v11364
  %v11666 = vpop.f32.mrb[0].mxu0
  %v11667 = vadd.f32 0.0, %v11666
  %v11668 = vpop.f32.mrb[0].mxu0
  %11669 = vmatprep.mubr.f32.mxu0 0.0
  %11670 = vmatmul.mubr.f32.gmra.mrb[0].mxu0 %v11367
  %v11671 = vpop.f32.mrb[0].mxu0
  %v11672 = vadd.f32 0.0, %v11671
  %v11673 = vpop.f32.mrb[0].mxu0
  %11674 = vmatprep.mubr.f32.mxu0 0.0
  %11675 = vmatmul.mubr.f32.gmra.mrb[0].mxu0 %v11370
  %v11676 = vpop.f32.mrb[0].mxu0
  %v11677 = vadd.f32 0.0, %v11676
  %v11678 = vpop.f32.mrb[0].mxu0
  %11679 = vmatprep.mubr.f32.mxu0 0.0
  %11680 = vmatmul.mubr.f32.gmra.mrb[0].mxu0 %v11373
  %v11681 = vpop.f32.mrb[0].mxu0
  %v11682 = vadd.f32 0.0, %v11681
  %v11683 = vpop.f32.mrb[0].mxu0
  %11684 = vmatprep.mubr.f32.mxu0 0.0
  %11685 = vmatmul.mubr.f32.gmra.mrb[0].mxu0 %v11376
  %v11686 = vpop.f32.mrb[0].mxu0
  %v11687 = vadd.f32 0.0, %v11686
  %v11688 = vpop.f32.mrb[0].mxu0
  %11689 = vmatprep.mubr.f32.mxu0 0.0
  %11690 = vmatmul.mubr.f32.gmra.mrb[0].mxu0 %v11379
  %v11691 = vpop.f32.mrb[0].mxu0
  %v11692 = vadd.f32 0.0, %v11691
  %v11693 = vpop.f32.mrb[0].mxu0
  %11694 = vmatprep.mubr.f32.mxu0 0.0
  %11695 = vmatmul.mubr.f32.gmra.mrb[0].mxu0 %v11382
  %v11696 = vpop.f32.mrb[0].mxu0
  %v11697 = vadd.f32 0.0, %v11696
  %v11698 = vpop.f32.mrb[0].mxu0
  %11699 = vmatprep.mubr.f32.mxu0 0.0
  %11700 = vmatmul.mubr.f32.gmra.mrb[0].mxu0 %v11385
  %v11701 = vpop.f32.mrb[0].mxu0
  %v11702 = vadd.f32 0.0, %v11701
  %v11703 = vpop.f32.mrb[0].mxu0
  %11704 = vmatprep.mubr.f32.mxu0 0.0
  %11705 = vmatmul.mubr.f32.gmra.mrb[0].mxu0 %v11388
  %v11706 = vpop.f32.mrb[0].mxu0
  %v11707 = vadd.f32 0.0, %v11706
  %v11708 = vpop.f32.mrb[0].mxu0
  %11709 = vmatprep.mubr.f32.mxu0 0.0
  %11710 = vmatmul.mubr.f32.gmra.mrb[0].mxu0 %v11391
  %v11711 = vpop.f32.mrb[0].mxu0
  %v11712 = vadd.f32 0.0, %v11711
  %v11713 = vpop.f32.mrb[0].mxu0
  %11714 = vmatprep.mubr.f32.mxu0 0.0
  %11715 = vmatmul.mubr.f32.gmra.mrb[0].mxu0 %v11394
  %v11716 = vpop.f32.mrb[0].mxu0
  %v11717 = vadd.f32 0.0, %v11716
  %v11718 = vpop.f32.mrb[0].mxu0
  %11719 = vmatprep.mubr.f32.mxu0 0.0
  %11720 = vmatmul.mubr.f32.gmra.mrb[0].mxu0 %v11397
  %v11721 = vpop.f32.mrb[0].mxu0
  %v11722 = vadd.f32 0.0, %v11721
  %v11723 = vpop.f32.mrb[0].mxu0
  %11724 = vmatprep.mubr.f32.mxu0 0.0
  %11725 = vmatmul.mubr.f32.gmra.mrb[0].mxu0 %v11400
  %v11726 = vpop.f32.mrb[0].mxu0
  %v11727 = vadd.f32 0.0, %v11726
  %v11728 = vpop.f32.mrb[0].mxu0
  %11729 = vmatprep.mubr.f32.mxu0 0.0
  %11730 = vmatmul.mubr.f32.gmra.mrb[0].mxu0 %v11403
  %v11731 = vpop.f32.mrb[0].mxu0
  %v11732 = vadd.f32 0.0, %v11731
  %v11733 = vpop.f32.mrb[0].mxu0
  %11734 = vmatprep.mubr.f32.mxu0 0.0
  %11735 = vmatmul.mubr.f32.gmra.mrb[0].mxu0 %v11406
  %v11736 = vpop.f32.mrb[0].mxu0
  %v11737 = vadd.f32 0.0, %v11736
  %v11738 = vpop.f32.mrb[0].mxu0
  %11739 = vmatprep.mubr.f32.mxu0 0.0
  %11740 = vmatmul.mubr.f32.gmra.mrb[0].mxu0 %v11409
  %v11741 = vpop.f32.mrb[0].mxu0
  %v11742 = vadd.f32 0.0, %v11741
  %v11743 = vpop.f32.mrb[0].mxu0
  %11744 = vmatprep.mubr.f32.mxu0 0.0
  %11745 = vmatmul.mubr.f32.gmra.mrb[0].mxu0 %v11412
  %v11746 = vpop.f32.mrb[0].mxu0
  %v11747 = vadd.f32 0.0, %v11746
  %v11748 = vpop.f32.mrb[0].mxu0
  %11749 = vmatprep.mubr.f32.mxu0 0.0
  %11750 = vmatmul.mubr.f32.gmra.mrb[0].mxu0 %v11415
  %v11751 = vpop.f32.mrb[0].mxu0
  %v11752 = vadd.f32 0.0, %v11751
  %v11753 = vpop.f32.mrb[0].mxu0
  %11754 = vmatprep.mubr.f32.mxu0 0.0
  %11755 = vmatmul.mubr.f32.gmra.mrb[0].mxu0 %v11418
  %v11756 = vpop.f32.mrb[0].mxu0
  %v11757 = vadd.f32 0.0, %v11756
  %v11758 = vpop.f32.mrb[0].mxu0
  %11759 = vmatprep.mubr.f32.mxu0 0.0
  %11760 = vmatmul.mubr.f32.gmra.mrb[0].mxu0 %v11421
  %v11761 = vpop.f32.mrb[0].mxu0
  %v11762 = vadd.f32 0.0, %v11761
  %v11763 = vpop.f32.mrb[0].mxu0
  %11764 = vmatprep.mubr.f32.mxu0 0.0
  %11765 = vmatmul.mubr.f32.gmra.mrb[0].mxu0 %v11424
  %v11766 = vpop.f32.mrb[0].mxu0
  %v11767 = vadd.f32 0.0, %v11766
  %v11768 = vpop.f32.mrb[0].mxu0
  %11769 = vmatprep.mubr.f32.mxu0 0.0
  %11770 = vmatmul.mubr.f32.gmra.mrb[0].mxu0 %v11427
  %v11771 = vpop.f32.mrb[0].mxu0
  %v11772 = vadd.f32 0.0, %v11771
  %v11773 = vpop.f32.mrb[0].mxu0
  %11774 = vmatprep.mubr.f32.mxu0 0.0
  %11775 = vmatmul.mubr.f32.gmra.mrb[0].mxu0 %v11430
  %v11776 = vpop.f32.mrb[0].mxu0
  %v11777 = vadd.f32 0.0, %v11776
  %v11778 = vpop.f32.mrb[0].mxu0
  %11779 = vmatprep.mubr.f32.mxu0 0.0
  %11780 = vmatmul.mubr.f32.gmra.mrb[0].mxu0 %v11433
  %v11781 = vpop.f32.mrb[0].mxu0
  %v11782 = vadd.f32 0.0, %v11781
  %v11783 = vpop.f32.mrb[0].mxu0
  %11784 = vmatprep.mubr.f32.mxu0 0.0
  %11785 = vmatmul.mubr.f32.gmra.mrb[0].mxu0 %v11436
  %v11786 = vpop.f32.mrb[0].mxu0
  %v11787 = vadd.f32 0.0, %v11786
  %v11788 = vpop.f32.mrb[0].mxu0
  %11789 = vmatprep.mubr.f32.mxu0 0.0
  %11790 = vmatmul.mubr.f32.gmra.mrb[0].mxu0 %v11439
  %v11791 = vpop.f32.mrb[0].mxu0
  %v11792 = vadd.f32 0.0, %v11791
  %v11793 = vpop.f32.mrb[0].mxu0
  %11794 = vmatprep.mubr.f32.mxu0 0.0
  %11795 = vmatmul.mubr.f32.gmra.mrb[0].mxu0 %v11442
  %v11796 = vpop.f32.mrb[0].mxu0
  %v11797 = vadd.f32 0.0, %v11796
  %v11798 = vpop.f32.mrb[0].mxu0
  %11799 = vmatprep.mubr.f32.mxu0 0.0
  %11800 = vmatmul.mubr.f32.gmra.mrb[0].mxu0 %v11445
  %v11801 = vpop.f32.mrb[0].mxu0
  %v11802 = vadd.f32 0.0, %v11801
  %v11803 = vpop.f32.mrb[0].mxu0
  %11804 = vmatprep.mubr.f32.mxu0 0.0
  %11805 = vmatmul.mubr.f32.gmra.mrb[0].mxu0 %v11448
  %v11806 = vpop.f32.mrb[0].mxu0
  %v11807 = vadd.f32 0.0, %v11806
  %v11808 = vpop.f32.mrb[0].mxu0
  %11809 = vmatprep.mubr.f32.mxu0 0.0
  %11810 = vmatmul.mubr.f32.gmra.mrb[0].mxu0 %v11451
  %v11811 = vpop.f32.mrb[0].mxu0
  %v11812 = vadd.f32 0.0, %v11811
  %v11813 = vpop.f32.mrb[0].mxu0
  %11814 = vmatprep.mubr.f32.mxu0 0.0
  %11815 = vmatmul.mubr.f32.gmra.mrb[0].mxu0 %v11454
  %v11816 = vpop.f32.mrb[0].mxu0
  %v11817 = vadd.f32 0.0, %v11816
  %v11818 = vpop.f32.mrb[0].mxu0
  %11819 = vmatprep.mubr.f32.mxu0 0.0
  %11820 = vmatmul.mubr.f32.gmra.mrb[0].mxu0 %v11457
  %v11821 = vpop.f32.mrb[0].mxu0
  %v11822 = vadd.f32 0.0, %v11821
  %v11823 = vpop.f32.mrb[0].mxu0
  %11824 = vmatprep.mubr.f32.mxu0 0.0
  %11825 = vmatmul.mubr.f32.gmra.mrb[0].mxu0 %v11460
  %v11826 = vpop.f32.mrb[0].mxu0
  %v11827 = vadd.f32 0.0, %v11826
  %v11828 = vpop.f32.mrb[0].mxu0
  %11829 = vmatprep.mubr.f32.mxu0 0.0
  %11830 = vmatmul.mubr.f32.gmra.mrb[0].mxu0 %v11463
  %v11831 = vpop.f32.mrb[0].mxu0
  %v11832 = vadd.f32 0.0, %v11831
  %v11833 = vpop.f32.mrb[0].mxu0
  %11834 = vmatprep.mubr.f32.mxu0 0.0
  %11835 = vmatmul.mubr.f32.gmra.mrb[0].mxu0 %v11466
  %v11836 = vpop.f32.mrb[0].mxu0
  %v11837 = vadd.f32 0.0, %v11836
  %v11838 = vpop.f32.mrb[0].mxu0
  %11839 = vmatprep.mubr.f32.mxu0 0.0
  %11840 = vmatmul.mubr.f32.gmra.mrb[0].mxu0 %v11469
  %v11841 = vpop.f32.mrb[0].mxu0
  %v11842 = vadd.f32 0.0, %v11841
  %v11843 = vpop.f32.mrb[0].mxu0
  %11844 = vmatprep.mubr.f32.mxu0 0.0
  %11845 = vmatmul.mubr.f32.gmra.mrb[0].mxu0 %v11472
  %v11846 = vpop.f32.mrb[0].mxu0
  %v11847 = vadd.f32 0.0, %v11846
  %v11848 = vpop.f32.mrb[0].mxu0
  %11849 = vmatprep.mubr.f32.mxu0 0.0
  %11850 = vmatmul.mubr.f32.gmra.mrb[0].mxu0 %v11475
  %v11851 = vpop.f32.mrb[0].mxu0
  %v11852 = vadd.f32 0.0, %v11851
  %v11853 = vpop.f32.mrb[0].mxu0
  %11854 = vmatprep.mubr.f32.mxu0 0.0
  %11855 = vmatmul.mubr.f32.gmra.mrb[0].mxu0 %v11478
  %v11856 = vpop.f32.mrb[0].mxu0
  %v11857 = vadd.f32 0.0, %v11856
  %v11858 = vpop.f32.mrb[0].mxu0
  %11859 = vmatprep.mubr.f32.mxu0 0.0
  %11860 = vmatmul.mubr.f32.gmra.mrb[0].mxu0 %v11481
  %v11861 = vpop.f32.mrb[0].mxu0
  %v11862 = vadd.f32 0.0, %v11861
  %v11863 = vpop.f32.mrb[0].mxu0
  %11864 = vmatprep.mubr.f32.mxu0 0.0
  %11865 = vmatmul.mubr.f32.gmra.mrb[0].mxu0 %v11484
  %v11866 = vpop.f32.mrb[0].mxu0
  %v11867 = vadd.f32 0.0, %v11866
  %v11868 = vpop.f32.mrb[0].mxu0
  %11869 = vmatprep.mubr.f32.mxu0 0.0
  %11870 = vmatmul.mubr.f32.gmra.mrb[0].mxu0 %v11487
  %v11871 = vpop.f32.mrb[0].mxu0
  %v11872 = vadd.f32 0.0, %v11871
  %v11873 = vpop.f32.mrb[0].mxu0
  %11874 = vmatprep.mubr.f32.mxu0 0.0
  %11875 = vmatmul.mubr.f32.gmra.mrb[0].mxu0 %v11490
  %v11876 = vpop.f32.mrb[0].mxu0
  %v11877 = vadd.f32 0.0, %v11876
  %v11878 = vpop.f32.mrb[0].mxu0
  %11879 = vdwg.mxu0
  %v11880 = vadd.f32 %v11172, %v11562
  %v11881 = vadd.f32 %v11173, %v11567
  %v11882 = vadd.f32 %v11174, %v11572
  %v11883 = vadd.f32 %v11175, %v11577
  %v11884 = vadd.f32 %v11176, %v11582
  %v11885 = vadd.f32 %v11177, %v11587
  %v11886 = vadd.f32 %v11178, %v11592
  %v11887 = vadd.f32 %v11179, %v11597
  %v11888 = vadd.f32 %v11180, %v11602
  %v11889 = vadd.f32 %v11181, %v11607
  %v11890 = vadd.f32 %v11182, %v11612
  %v11891 = vadd.f32 %v11183, %v11617
  %v11892 = vadd.f32 %v11184, %v11622
  %v11893 = vadd.f32 %v11185, %v11627
  %v11894 = vadd.f32 %v11186, %v11632
  %v11895 = vadd.f32 %v11187, %v11637
  %v11896 = vadd.f32 %v11188, %v11642
  %v11897 = vadd.f32 %v11189, %v11647
  %v11898 = vadd.f32 %v11190, %v11652
  %v11899 = vadd.f32 %v11191, %v11657
  %v11900 = vadd.f32 %v11192, %v11662
  %v11901 = vadd.f32 %v11193, %v11667
  %v11902 = vadd.f32 %v11194, %v11672
  %v11903 = vadd.f32 %v11195, %v11677
  %v11904 = vadd.f32 %v11196, %v11682
  %v11905 = vadd.f32 %v11197, %v11687
  %v11906 = vadd.f32 %v11198, %v11692
  %v11907 = vadd.f32 %v11199, %v11697
  %v11908 = vadd.f32 %v11200, %v11702
  %v11909 = vadd.f32 %v11201, %v11707
  %v11910 = vadd.f32 %v11202, %v11712
  %v11911 = vadd.f32 %v11203, %v11717
  %v11912 = vadd.f32 %v11204, %v11722
  %v11913 = vadd.f32 %v11205, %v11727
  %v11914 = vadd.f32 %v11206, %v11732
  %v11915 = vadd.f32 %v11207, %v11737
  %v11916 = vadd.f32 %v11208, %v11742
  %v11917 = vadd.f32 %v11209, %v11747
  %v11918 = vadd.f32 %v11210, %v11752
  %v11919 = vadd.f32 %v11211, %v11757
  %v11920 = vadd.f32 %v11212, %v11762
  %v11921 = vadd.f32 %v11213, %v11767
  %v11922 = vadd.f32 %v11214, %v11772
  %v11923 = vadd.f32 %v11215, %v11777
  %v11924 = vadd.f32 %v11216, %v11782
  %v11925 = vadd.f32 %v11217, %v11787
  %v11926 = vadd.f32 %v11218, %v11792
  %v11927 = vadd.f32 %v11219, %v11797
  %v11928 = vadd.f32 %v11220, %v11802
  %v11929 = vadd.f32 %v11221, %v11807
  %v11930 = vadd.f32 %v11222, %v11812
  %v11931 = vadd.f32 %v11223, %v11817
  %v11932 = vadd.f32 %v11224, %v11822
  %v11933 = vadd.f32 %v11225, %v11827
  %v11934 = vadd.f32 %v11226, %v11832
  %v11935 = vadd.f32 %v11227, %v11837
  %v11936 = vadd.f32 %v11228, %v11842
  %v11937 = vadd.f32 %v11229, %v11847
  %v11938 = vadd.f32 %v11230, %v11852
  %v11939 = vadd.f32 %v11231, %v11857
  %v11940 = vadd.f32 %v11232, %v11862
  %v11941 = vadd.f32 %v11233, %v11867
  %v11942 = vadd.f32 %v11234, %v11872
  %v11943 = vadd.f32 %v11235, %v11877
  %v11944 = vld [vmem:[%s4382 + $0x1] sm:$0xff]
  %v11945 = vld [vmem:[%s4382 + $0x9] sm:$0xff]
  %v11946 = vld [vmem:[%s4382 + $0x19] sm:$0xff]
  %v11947 = vld [vmem:[%s4382 + $0x21] sm:$0xff]
  %v11948 = vld [vmem:[%s4382 + $0x31] sm:$0xff]
  %v11949 = vld [vmem:[%s4382 + $0x39] sm:$0xff]
  %v11950 = vld [vmem:[%s4382 + $0x49] sm:$0xff]
  %v11951 = vld [vmem:[%s4382 + $0x51] sm:$0xff]
  %v11952 = vld [vmem:[%s4382 + $0x61] sm:$0xff]
  %v11953 = vld [vmem:[%s4382 + $0x69] sm:$0xff]
  %v11954 = vld [vmem:[%s4382 + $0x79] sm:$0xff]
  %v11955 = vld [vmem:[%s4382 + $0x81] sm:$0xff]
  %v11956 = vld [vmem:[%s4382 + $0x91] sm:$0xff]
  %v11957 = vld [vmem:[%s4382 + $0x99] sm:$0xff]
  %v11958 = vld [vmem:[%s4382 + $0xa9] sm:$0xff]
  %v11959 = vld [vmem:[%s4382 + $0xb1] sm:$0xff]
  %v11960 = vld [vmem:[%s4382 + $0xc1] sm:$0xff]
  %v11961 = vld [vmem:[%s4382 + $0xc9] sm:$0xff]
  %v11962 = vld [vmem:[%s4382 + $0xd9] sm:$0xff]
  %v11963 = vld [vmem:[%s4382 + $0xe1] sm:$0xff]
  %v11964 = vld [vmem:[%s4382 + $0xf1] sm:$0xff]
  %v11965 = vld [vmem:[%s4382 + $0xf9] sm:$0xff]
  %v11966 = vld [vmem:[%s4382 + $0x109] sm:$0xff]
  %v11967 = vld [vmem:[%s4382 + $0x111] sm:$0xff]
  %v11968 = vld [vmem:[%s4382 + $0x121] sm:$0xff]
  %v11969 = vld [vmem:[%s4382 + $0x129] sm:$0xff]
  %v11970 = vld [vmem:[%s4382 + $0x139] sm:$0xff]
  %v11971 = vld [vmem:[%s4382 + $0x141] sm:$0xff]
  %v11972 = vld [vmem:[%s4382 + $0x151] sm:$0xff]
  %v11973 = vld [vmem:[%s4382 + $0x159] sm:$0xff]
  %v11974 = vld [vmem:[%s4382 + $0x169] sm:$0xff]
  %v11975 = vld [vmem:[%s4382 + $0x171] sm:$0xff]
  %v11976 = vld [vmem:[%s4382 + $0x1b1] sm:$0xff]
  %v11977 = vld [vmem:[%s4382 + $0x1b9] sm:$0xff]
  %v11978 = vld [vmem:[%s4382 + $0x1c9] sm:$0xff]
  %v11979 = vld [vmem:[%s4382 + $0x1d1] sm:$0xff]
  %v11980 = vld [vmem:[%s4382 + $0x1e1] sm:$0xff]
  %v11981 = vld [vmem:[%s4382 + $0x1e9] sm:$0xff]
  %v11982 = vld [vmem:[%s4382 + $0x1f9] sm:$0xff]
  %v11983 = vld [vmem:[%s4382 + $0x201] sm:$0xff]
  %v11984 = vld [vmem:[%s4382 + $0x211] sm:$0xff]
  %v11985 = vld [vmem:[%s4382 + $0x219] sm:$0xff]
  %v11986 = vld [vmem:[%s4382 + $0x229] sm:$0xff]
  %v11987 = vld [vmem:[%s4382 + $0x231] sm:$0xff]
  %v11988 = vld [vmem:[%s4382 + $0x241] sm:$0xff]
  %v11989 = vld [vmem:[%s4382 + $0x249] sm:$0xff]
  %v11990 = vld [vmem:[%s4382 + $0x259] sm:$0xff]
  %v11991 = vld [vmem:[%s4382 + $0x261] sm:$0xff]
  %v11992 = vld [vmem:[%s4382 + $0x271] sm:$0xff]
  %v11993 = vld [vmem:[%s4382 + $0x279] sm:$0xff]
  %v11994 = vld [vmem:[%s4382 + $0x289] sm:$0xff]
  %v11995 = vld [vmem:[%s4382 + $0x291] sm:$0xff]
  %v11996 = vld [vmem:[%s4382 + $0x2a1] sm:$0xff]
  %v11997 = vld [vmem:[%s4382 + $0x2a9] sm:$0xff]
  %v11998 = vld [vmem:[%s4382 + $0x2b9] sm:$0xff]
  %v11999 = vld [vmem:[%s4382 + $0x2c1] sm:$0xff]
  %v12000 = vld [vmem:[%s4382 + $0x2d1] sm:$0xff]
  %v12001 = vld [vmem:[%s4382 + $0x2d9] sm:$0xff]
  %v12002 = vld [vmem:[%s4382 + $0x2e9] sm:$0xff]
  %v12003 = vld [vmem:[%s4382 + $0x2f1] sm:$0xff]
  %v12004 = vld [vmem:[%s4382 + $0x301] sm:$0xff]
  %v12005 = vld [vmem:[%s4382 + $0x309] sm:$0xff]
  %v12006 = vld [vmem:[%s4382 + $0x319] sm:$0xff]
  %v12007 = vld [vmem:[%s4382 + $0x321] sm:$0xff]
  %v12009 = vsel %vm44, %v11944, 0
  %v12012 = vsel %vm44, %v11945, 0
  %v12015 = vsel %vm44, %v11946, 0
  %v12018 = vsel %vm44, %v11947, 0
  %v12021 = vsel %vm44, %v11948, 0
  %v12024 = vsel %vm44, %v11949, 0
  %v12027 = vsel %vm44, %v11950, 0
  %v12030 = vsel %vm44, %v11951, 0
  %v12033 = vsel %vm44, %v11952, 0
  %v12036 = vsel %vm44, %v11953, 0
  %v12039 = vsel %vm44, %v11954, 0
  %v12042 = vsel %vm44, %v11955, 0
  %v12045 = vsel %vm44, %v11956, 0
  %v12048 = vsel %vm44, %v11957, 0
  %v12051 = vsel %vm44, %v11958, 0
  %v12054 = vsel %vm44, %v11959, 0
  %v12057 = vsel %vm44, %v11960, 0
  %v12060 = vsel %vm44, %v11961, 0
  %v12063 = vsel %vm44, %v11962, 0
  %v12066 = vsel %vm44, %v11963, 0
  %v12069 = vsel %vm44, %v11964, 0
  %v12072 = vsel %vm44, %v11965, 0
  %v12075 = vsel %vm44, %v11966, 0
  %v12078 = vsel %vm44, %v11967, 0
  %v12081 = vsel %vm44, %v11968, 0
  %v12084 = vsel %vm44, %v11969, 0
  %v12087 = vsel %vm44, %v11970, 0
  %v12090 = vsel %vm44, %v11971, 0
  %v12093 = vsel %vm44, %v11972, 0
  %v12096 = vsel %vm44, %v11973, 0
  %v12099 = vsel %vm44, %v11974, 0
  %v12102 = vsel %vm44, %v11975, 0
  %v12105 = vsel %vm44, %v11976, 0
  %v12108 = vsel %vm44, %v11977, 0
  %v12111 = vsel %vm44, %v11978, 0
  %v12114 = vsel %vm44, %v11979, 0
  %v12117 = vsel %vm44, %v11980, 0
  %v12120 = vsel %vm44, %v11981, 0
  %v12123 = vsel %vm44, %v11982, 0
  %v12126 = vsel %vm44, %v11983, 0
  %v12129 = vsel %vm44, %v11984, 0
  %v12132 = vsel %vm44, %v11985, 0
  %v12135 = vsel %vm44, %v11986, 0
  %v12138 = vsel %vm44, %v11987, 0
  %v12141 = vsel %vm44, %v11988, 0
  %v12144 = vsel %vm44, %v11989, 0
  %v12147 = vsel %vm44, %v11990, 0
  %v12150 = vsel %vm44, %v11991, 0
  %v12153 = vsel %vm44, %v11992, 0
  %v12156 = vsel %vm44, %v11993, 0
  %v12159 = vsel %vm44, %v11994, 0
  %v12162 = vsel %vm44, %v11995, 0
  %v12165 = vsel %vm44, %v11996, 0
  %v12168 = vsel %vm44, %v11997, 0
  %v12171 = vsel %vm44, %v11998, 0
  %v12174 = vsel %vm44, %v11999, 0
  %v12177 = vsel %vm44, %v12000, 0
  %v12180 = vsel %vm44, %v12001, 0
  %v12183 = vsel %vm44, %v12002, 0
  %v12186 = vsel %vm44, %v12003, 0
  %v12189 = vsel %vm44, %v12004, 0
  %v12192 = vsel %vm44, %v12005, 0
  %v12195 = vsel %vm44, %v12006, 0
  %v12198 = vsel %vm44, %v12007, 0
  %v12201 = vsel %vm581, %v42, 0
  %12203 = vmatprep.subr.mxu0 0.0
  %12204 = vmatpush1.msra.mxu0 %v12201
  %12205 = vmatprep.subr.mxu0 0.0
  %12206 = vmatpush1.msra.mxu0 0.0
  %12207 = vmatprep.subr.mxu0 0.0
  %12208 = vmatpush1.msra.mxu0 0.0
  %12209 = vmatprep.subr.mxu0 0.0
  %12210 = vmatpush1.msra.mxu0 0.0
  %12211 = vmatprep.subr.mxu0 0.0
  %12212 = vmatpush1.msra.mxu0 0.0
  %12213 = vmatprep.subr.mxu0 0.0
  %12214 = vmatpush1.msra.mxu0 0.0
  %12215 = vmatprep.subr.mxu0 0.0
  %12216 = vmatpush1.msra.mxu0 0.0
  %12217 = vmatprep.subr.mxu0 0.0
  %12218 = vmatpush1.msra.mxu0 0.0
  %12219 = vmatprep.subr.mxu0 0.0
  %12220 = vmatpush1.msra.mxu0 0.0
  %12221 = vmatprep.subr.mxu0 0.0
  %12222 = vmatpush1.msra.mxu0 0.0
  %12223 = vmatprep.subr.mxu0 0.0
  %12224 = vmatpush1.msra.mxu0 0.0
  %12225 = vmatprep.subr.mxu0 0.0
  %12226 = vmatpush1.msra.mxu0 0.0
  %12227 = vmatprep.subr.mxu0 0.0
  %12228 = vmatpush1.msra.mxu0 0.0
  %12229 = vmatprep.subr.mxu0 0.0
  %12230 = vmatpush1.msra.mxu0 0.0
  %12231 = vmatprep.subr.mxu0 0.0
  %12232 = vmatpush1.msra.mxu0 0.0
  %12233 = vmatprep.subr.mxu0 0.0
  %12234 = vmatpush1.msra.mxu0 0.0
  %12235 = vmatprep.subr.mxu0 0.0
  %12236 = vmatpush1.msra.mxu0 0.0
  %12237 = vmatprep.subr.mxu0 0.0
  %12238 = vmatpush1.msra.mxu0 0.0
  %12239 = vmatprep.subr.mxu0 0.0
  %12240 = vmatpush1.msra.mxu0 0.0
  %12241 = vmatprep.subr.mxu0 0.0
  %12242 = vmatpush1.msra.mxu0 0.0
  %12243 = vmatprep.subr.mxu0 0.0
  %12244 = vmatpush1.msra.mxu0 0.0
  %12245 = vmatprep.subr.mxu0 0.0
  %12246 = vmatpush1.msra.mxu0 0.0
  %12247 = vmatprep.subr.mxu0 0.0
  %12248 = vmatpush1.msra.mxu0 0.0
  %12249 = vmatprep.subr.mxu0 0.0
  %12250 = vmatpush1.msra.mxu0 0.0
  %12251 = vmatprep.subr.mxu0 0.0
  %12252 = vmatpush1.msra.mxu0 0.0
  %12253 = vmatprep.subr.mxu0 0.0
  %12254 = vmatpush1.msra.mxu0 0.0
  %12255 = vmatprep.subr.mxu0 0.0
  %12256 = vmatpush1.msra.mxu0 0.0
  %12257 = vmatprep.subr.mxu0 0.0
  %12258 = vmatpush1.msra.mxu0 0.0
  %12259 = vmatprep.subr.mxu0 0.0
  %12260 = vmatpush1.msra.mxu0 0.0
  %12261 = vmatprep.subr.mxu0 0.0
  %12262 = vmatpush1.msra.mxu0 0.0
  %12263 = vmatprep.subr.mxu0 0.0
  %12264 = vmatpush1.msra.mxu0 0.0
  %12265 = vmatprep.subr.mxu0 0.0
  %12266 = vmatpush1.msra.mxu0 0.0
  %12267 = vmatprep.mubr.f32.mxu0 0.0
  %12268 = vmatmul.mubr.f32.gmra.mrb[0].mxu0 %v12009
  %v12269 = vpop.f32.mrb[0].mxu0
  %v12270 = vadd.f32 0.0, %v12269
  %v12271 = vpop.f32.mrb[0].mxu0
  %12272 = vmatprep.mubr.f32.mxu0 0.0
  %12273 = vmatmul.mubr.f32.gmra.mrb[0].mxu0 %v12012
  %v12274 = vpop.f32.mrb[0].mxu0
  %v12275 = vadd.f32 0.0, %v12274
  %v12276 = vpop.f32.mrb[0].mxu0
  %12277 = vmatprep.mubr.f32.mxu0 0.0
  %12278 = vmatmul.mubr.f32.gmra.mrb[0].mxu0 %v12015
  %v12279 = vpop.f32.mrb[0].mxu0
  %v12280 = vadd.f32 0.0, %v12279
  %v12281 = vpop.f32.mrb[0].mxu0
  %12282 = vmatprep.mubr.f32.mxu0 0.0
  %12283 = vmatmul.mubr.f32.gmra.mrb[0].mxu0 %v12018
  %v12284 = vpop.f32.mrb[0].mxu0
  %v12285 = vadd.f32 0.0, %v12284
  %v12286 = vpop.f32.mrb[0].mxu0
  %12287 = vmatprep.mubr.f32.mxu0 0.0
  %12288 = vmatmul.mubr.f32.gmra.mrb[0].mxu0 %v12021
  %v12289 = vpop.f32.mrb[0].mxu0
  %v12290 = vadd.f32 0.0, %v12289
  %v12291 = vpop.f32.mrb[0].mxu0
  %12292 = vmatprep.mubr.f32.mxu0 0.0
  %12293 = vmatmul.mubr.f32.gmra.mrb[0].mxu0 %v12024
  %v12294 = vpop.f32.mrb[0].mxu0
  %v12295 = vadd.f32 0.0, %v12294
  %v12296 = vpop.f32.mrb[0].mxu0
  %12297 = vmatprep.mubr.f32.mxu0 0.0
  %12298 = vmatmul.mubr.f32.gmra.mrb[0].mxu0 %v12027
  %v12299 = vpop.f32.mrb[0].mxu0
  %v12300 = vadd.f32 0.0, %v12299
  %v12301 = vpop.f32.mrb[0].mxu0
  %12302 = vmatprep.mubr.f32.mxu0 0.0
  %12303 = vmatmul.mubr.f32.gmra.mrb[0].mxu0 %v12030
  %v12304 = vpop.f32.mrb[0].mxu0
  %v12305 = vadd.f32 0.0, %v12304
  %v12306 = vpop.f32.mrb[0].mxu0
  %12307 = vmatprep.mubr.f32.mxu0 0.0
  %12308 = vmatmul.mubr.f32.gmra.mrb[0].mxu0 %v12033
  %v12309 = vpop.f32.mrb[0].mxu0
  %v12310 = vadd.f32 0.0, %v12309
  %v12311 = vpop.f32.mrb[0].mxu0
  %12312 = vmatprep.mubr.f32.mxu0 0.0
  %12313 = vmatmul.mubr.f32.gmra.mrb[0].mxu0 %v12036
  %v12314 = vpop.f32.mrb[0].mxu0
  %v12315 = vadd.f32 0.0, %v12314
  %v12316 = vpop.f32.mrb[0].mxu0
  %12317 = vmatprep.mubr.f32.mxu0 0.0
  %12318 = vmatmul.mubr.f32.gmra.mrb[0].mxu0 %v12039
  %v12319 = vpop.f32.mrb[0].mxu0
  %v12320 = vadd.f32 0.0, %v12319
  %v12321 = vpop.f32.mrb[0].mxu0
  %12322 = vmatprep.mubr.f32.mxu0 0.0
  %12323 = vmatmul.mubr.f32.gmra.mrb[0].mxu0 %v12042
  %v12324 = vpop.f32.mrb[0].mxu0
  %v12325 = vadd.f32 0.0, %v12324
  %v12326 = vpop.f32.mrb[0].mxu0
  %12327 = vmatprep.mubr.f32.mxu0 0.0
  %12328 = vmatmul.mubr.f32.gmra.mrb[0].mxu0 %v12045
  %v12329 = vpop.f32.mrb[0].mxu0
  %v12330 = vadd.f32 0.0, %v12329
  %v12331 = vpop.f32.mrb[0].mxu0
  %12332 = vmatprep.mubr.f32.mxu0 0.0
  %12333 = vmatmul.mubr.f32.gmra.mrb[0].mxu0 %v12048
  %v12334 = vpop.f32.mrb[0].mxu0
  %v12335 = vadd.f32 0.0, %v12334
  %v12336 = vpop.f32.mrb[0].mxu0
  %12337 = vmatprep.mubr.f32.mxu0 0.0
  %12338 = vmatmul.mubr.f32.gmra.mrb[0].mxu0 %v12051
  %v12339 = vpop.f32.mrb[0].mxu0
  %v12340 = vadd.f32 0.0, %v12339
  %v12341 = vpop.f32.mrb[0].mxu0
  %12342 = vmatprep.mubr.f32.mxu0 0.0
  %12343 = vmatmul.mubr.f32.gmra.mrb[0].mxu0 %v12054
  %v12344 = vpop.f32.mrb[0].mxu0
  %v12345 = vadd.f32 0.0, %v12344
  %v12346 = vpop.f32.mrb[0].mxu0
  %12347 = vmatprep.mubr.f32.mxu0 0.0
  %12348 = vmatmul.mubr.f32.gmra.mrb[0].mxu0 %v12057
  %v12349 = vpop.f32.mrb[0].mxu0
  %v12350 = vadd.f32 0.0, %v12349
  %v12351 = vpop.f32.mrb[0].mxu0
  %12352 = vmatprep.mubr.f32.mxu0 0.0
  %12353 = vmatmul.mubr.f32.gmra.mrb[0].mxu0 %v12060
  %v12354 = vpop.f32.mrb[0].mxu0
  %v12355 = vadd.f32 0.0, %v12354
  %v12356 = vpop.f32.mrb[0].mxu0
  %12357 = vmatprep.mubr.f32.mxu0 0.0
  %12358 = vmatmul.mubr.f32.gmra.mrb[0].mxu0 %v12063
  %v12359 = vpop.f32.mrb[0].mxu0
  %v12360 = vadd.f32 0.0, %v12359
  %v12361 = vpop.f32.mrb[0].mxu0
  %12362 = vmatprep.mubr.f32.mxu0 0.0
  %12363 = vmatmul.mubr.f32.gmra.mrb[0].mxu0 %v12066
  %v12364 = vpop.f32.mrb[0].mxu0
  %v12365 = vadd.f32 0.0, %v12364
  %v12366 = vpop.f32.mrb[0].mxu0
  %12367 = vmatprep.mubr.f32.mxu0 0.0
  %12368 = vmatmul.mubr.f32.gmra.mrb[0].mxu0 %v12069
  %v12369 = vpop.f32.mrb[0].mxu0
  %v12370 = vadd.f32 0.0, %v12369
  %v12371 = vpop.f32.mrb[0].mxu0
  %12372 = vmatprep.mubr.f32.mxu0 0.0
  %12373 = vmatmul.mubr.f32.gmra.mrb[0].mxu0 %v12072
  %v12374 = vpop.f32.mrb[0].mxu0
  %v12375 = vadd.f32 0.0, %v12374
  %v12376 = vpop.f32.mrb[0].mxu0
  %12377 = vmatprep.mubr.f32.mxu0 0.0
  %12378 = vmatmul.mubr.f32.gmra.mrb[0].mxu0 %v12075
  %v12379 = vpop.f32.mrb[0].mxu0
  %v12380 = vadd.f32 0.0, %v12379
  %v12381 = vpop.f32.mrb[0].mxu0
  %12382 = vmatprep.mubr.f32.mxu0 0.0
  %12383 = vmatmul.mubr.f32.gmra.mrb[0].mxu0 %v12078
  %v12384 = vpop.f32.mrb[0].mxu0
  %v12385 = vadd.f32 0.0, %v12384
  %v12386 = vpop.f32.mrb[0].mxu0
  %12387 = vmatprep.mubr.f32.mxu0 0.0
  %12388 = vmatmul.mubr.f32.gmra.mrb[0].mxu0 %v12081
  %v12389 = vpop.f32.mrb[0].mxu0
  %v12390 = vadd.f32 0.0, %v12389
  %v12391 = vpop.f32.mrb[0].mxu0
  %12392 = vmatprep.mubr.f32.mxu0 0.0
  %12393 = vmatmul.mubr.f32.gmra.mrb[0].mxu0 %v12084
  %v12394 = vpop.f32.mrb[0].mxu0
  %v12395 = vadd.f32 0.0, %v12394
  %v12396 = vpop.f32.mrb[0].mxu0
  %12397 = vmatprep.mubr.f32.mxu0 0.0
  %12398 = vmatmul.mubr.f32.gmra.mrb[0].mxu0 %v12087
  %v12399 = vpop.f32.mrb[0].mxu0
  %v12400 = vadd.f32 0.0, %v12399
  %v12401 = vpop.f32.mrb[0].mxu0
  %12402 = vmatprep.mubr.f32.mxu0 0.0
  %12403 = vmatmul.mubr.f32.gmra.mrb[0].mxu0 %v12090
  %v12404 = vpop.f32.mrb[0].mxu0
  %v12405 = vadd.f32 0.0, %v12404
  %v12406 = vpop.f32.mrb[0].mxu0
  %12407 = vmatprep.mubr.f32.mxu0 0.0
  %12408 = vmatmul.mubr.f32.gmra.mrb[0].mxu0 %v12093
  %v12409 = vpop.f32.mrb[0].mxu0
  %v12410 = vadd.f32 0.0, %v12409
  %v12411 = vpop.f32.mrb[0].mxu0
  %12412 = vmatprep.mubr.f32.mxu0 0.0
  %12413 = vmatmul.mubr.f32.gmra.mrb[0].mxu0 %v12096
  %v12414 = vpop.f32.mrb[0].mxu0
  %v12415 = vadd.f32 0.0, %v12414
  %v12416 = vpop.f32.mrb[0].mxu0
  %12417 = vmatprep.mubr.f32.mxu0 0.0
  %12418 = vmatmul.mubr.f32.gmra.mrb[0].mxu0 %v12099
  %v12419 = vpop.f32.mrb[0].mxu0
  %v12420 = vadd.f32 0.0, %v12419
  %v12421 = vpop.f32.mrb[0].mxu0
  %12422 = vmatprep.mubr.f32.mxu0 0.0
  %12423 = vmatmul.mubr.f32.gmra.mrb[0].mxu0 %v12102
  %v12424 = vpop.f32.mrb[0].mxu0
  %v12425 = vadd.f32 0.0, %v12424
  %v12426 = vpop.f32.mrb[0].mxu0
  %12427 = vmatprep.mubr.f32.mxu0 0.0
  %12428 = vmatmul.mubr.f32.gmra.mrb[0].mxu0 %v12105
  %v12429 = vpop.f32.mrb[0].mxu0
  %v12430 = vadd.f32 0.0, %v12429
  %v12431 = vpop.f32.mrb[0].mxu0
  %12432 = vmatprep.mubr.f32.mxu0 0.0
  %12433 = vmatmul.mubr.f32.gmra.mrb[0].mxu0 %v12108
  %v12434 = vpop.f32.mrb[0].mxu0
  %v12435 = vadd.f32 0.0, %v12434
  %v12436 = vpop.f32.mrb[0].mxu0
  %12437 = vmatprep.mubr.f32.mxu0 0.0
  %12438 = vmatmul.mubr.f32.gmra.mrb[0].mxu0 %v12111
  %v12439 = vpop.f32.mrb[0].mxu0
  %v12440 = vadd.f32 0.0, %v12439
  %v12441 = vpop.f32.mrb[0].mxu0
  %12442 = vmatprep.mubr.f32.mxu0 0.0
  %12443 = vmatmul.mubr.f32.gmra.mrb[0].mxu0 %v12114
  %v12444 = vpop.f32.mrb[0].mxu0
  %v12445 = vadd.f32 0.0, %v12444
  %v12446 = vpop.f32.mrb[0].mxu0
  %12447 = vmatprep.mubr.f32.mxu0 0.0
  %12448 = vmatmul.mubr.f32.gmra.mrb[0].mxu0 %v12117
  %v12449 = vpop.f32.mrb[0].mxu0
  %v12450 = vadd.f32 0.0, %v12449
  %v12451 = vpop.f32.mrb[0].mxu0
  %12452 = vmatprep.mubr.f32.mxu0 0.0
  %12453 = vmatmul.mubr.f32.gmra.mrb[0].mxu0 %v12120
  %v12454 = vpop.f32.mrb[0].mxu0
  %v12455 = vadd.f32 0.0, %v12454
  %v12456 = vpop.f32.mrb[0].mxu0
  %12457 = vmatprep.mubr.f32.mxu0 0.0
  %12458 = vmatmul.mubr.f32.gmra.mrb[0].mxu0 %v12123
  %v12459 = vpop.f32.mrb[0].mxu0
  %v12460 = vadd.f32 0.0, %v12459
  %v12461 = vpop.f32.mrb[0].mxu0
  %12462 = vmatprep.mubr.f32.mxu0 0.0
  %12463 = vmatmul.mubr.f32.gmra.mrb[0].mxu0 %v12126
  %v12464 = vpop.f32.mrb[0].mxu0
  %v12465 = vadd.f32 0.0, %v12464
  %v12466 = vpop.f32.mrb[0].mxu0
  %12467 = vmatprep.mubr.f32.mxu0 0.0
  %12468 = vmatmul.mubr.f32.gmra.mrb[0].mxu0 %v12129
  %v12469 = vpop.f32.mrb[0].mxu0
  %v12470 = vadd.f32 0.0, %v12469
  %v12471 = vpop.f32.mrb[0].mxu0
  %12472 = vmatprep.mubr.f32.mxu0 0.0
  %12473 = vmatmul.mubr.f32.gmra.mrb[0].mxu0 %v12132
  %v12474 = vpop.f32.mrb[0].mxu0
  %v12475 = vadd.f32 0.0, %v12474
  %v12476 = vpop.f32.mrb[0].mxu0
  %12477 = vmatprep.mubr.f32.mxu0 0.0
  %12478 = vmatmul.mubr.f32.gmra.mrb[0].mxu0 %v12135
  %v12479 = vpop.f32.mrb[0].mxu0
  %v12480 = vadd.f32 0.0, %v12479
  %v12481 = vpop.f32.mrb[0].mxu0
  %12482 = vmatprep.mubr.f32.mxu0 0.0
  %12483 = vmatmul.mubr.f32.gmra.mrb[0].mxu0 %v12138
  %v12484 = vpop.f32.mrb[0].mxu0
  %v12485 = vadd.f32 0.0, %v12484
  %v12486 = vpop.f32.mrb[0].mxu0
  %12487 = vmatprep.mubr.f32.mxu0 0.0
  %12488 = vmatmul.mubr.f32.gmra.mrb[0].mxu0 %v12141
  %v12489 = vpop.f32.mrb[0].mxu0
  %v12490 = vadd.f32 0.0, %v12489
  %v12491 = vpop.f32.mrb[0].mxu0
  %12492 = vmatprep.mubr.f32.mxu0 0.0
  %12493 = vmatmul.mubr.f32.gmra.mrb[0].mxu0 %v12144
  %v12494 = vpop.f32.mrb[0].mxu0
  %v12495 = vadd.f32 0.0, %v12494
  %v12496 = vpop.f32.mrb[0].mxu0
  %12497 = vmatprep.mubr.f32.mxu0 0.0
  %12498 = vmatmul.mubr.f32.gmra.mrb[0].mxu0 %v12147
  %v12499 = vpop.f32.mrb[0].mxu0
  %v12500 = vadd.f32 0.0, %v12499
  %v12501 = vpop.f32.mrb[0].mxu0
  %12502 = vmatprep.mubr.f32.mxu0 0.0
  %12503 = vmatmul.mubr.f32.gmra.mrb[0].mxu0 %v12150
  %v12504 = vpop.f32.mrb[0].mxu0
  %v12505 = vadd.f32 0.0, %v12504
  %v12506 = vpop.f32.mrb[0].mxu0
  %12507 = vmatprep.mubr.f32.mxu0 0.0
  %12508 = vmatmul.mubr.f32.gmra.mrb[0].mxu0 %v12153
  %v12509 = vpop.f32.mrb[0].mxu0
  %v12510 = vadd.f32 0.0, %v12509
  %v12511 = vpop.f32.mrb[0].mxu0
  %12512 = vmatprep.mubr.f32.mxu0 0.0
  %12513 = vmatmul.mubr.f32.gmra.mrb[0].mxu0 %v12156
  %v12514 = vpop.f32.mrb[0].mxu0
  %v12515 = vadd.f32 0.0, %v12514
  %v12516 = vpop.f32.mrb[0].mxu0
  %12517 = vmatprep.mubr.f32.mxu0 0.0
  %12518 = vmatmul.mubr.f32.gmra.mrb[0].mxu0 %v12159
  %v12519 = vpop.f32.mrb[0].mxu0
  %v12520 = vadd.f32 0.0, %v12519
  %v12521 = vpop.f32.mrb[0].mxu0
  %12522 = vmatprep.mubr.f32.mxu0 0.0
  %12523 = vmatmul.mubr.f32.gmra.mrb[0].mxu0 %v12162
  %v12524 = vpop.f32.mrb[0].mxu0
  %v12525 = vadd.f32 0.0, %v12524
  %v12526 = vpop.f32.mrb[0].mxu0
  %12527 = vmatprep.mubr.f32.mxu0 0.0
  %12528 = vmatmul.mubr.f32.gmra.mrb[0].mxu0 %v12165
  %v12529 = vpop.f32.mrb[0].mxu0
  %v12530 = vadd.f32 0.0, %v12529
  %v12531 = vpop.f32.mrb[0].mxu0
  %12532 = vmatprep.mubr.f32.mxu0 0.0
  %12533 = vmatmul.mubr.f32.gmra.mrb[0].mxu0 %v12168
  %v12534 = vpop.f32.mrb[0].mxu0
  %v12535 = vadd.f32 0.0, %v12534
  %v12536 = vpop.f32.mrb[0].mxu0
  %12537 = vmatprep.mubr.f32.mxu0 0.0
  %12538 = vmatmul.mubr.f32.gmra.mrb[0].mxu0 %v12171
  %v12539 = vpop.f32.mrb[0].mxu0
  %v12540 = vadd.f32 0.0, %v12539
  %v12541 = vpop.f32.mrb[0].mxu0
  %12542 = vmatprep.mubr.f32.mxu0 0.0
  %12543 = vmatmul.mubr.f32.gmra.mrb[0].mxu0 %v12174
  %v12544 = vpop.f32.mrb[0].mxu0
  %v12545 = vadd.f32 0.0, %v12544
  %v12546 = vpop.f32.mrb[0].mxu0
  %12547 = vmatprep.mubr.f32.mxu0 0.0
  %12548 = vmatmul.mubr.f32.gmra.mrb[0].mxu0 %v12177
  %v12549 = vpop.f32.mrb[0].mxu0
  %v12550 = vadd.f32 0.0, %v12549
  %v12551 = vpop.f32.mrb[0].mxu0
  %12552 = vmatprep.mubr.f32.mxu0 0.0
  %12553 = vmatmul.mubr.f32.gmra.mrb[0].mxu0 %v12180
  %v12554 = vpop.f32.mrb[0].mxu0
  %v12555 = vadd.f32 0.0, %v12554
  %v12556 = vpop.f32.mrb[0].mxu0
  %12557 = vmatprep.mubr.f32.mxu0 0.0
  %12558 = vmatmul.mubr.f32.gmra.mrb[0].mxu0 %v12183
  %v12559 = vpop.f32.mrb[0].mxu0
  %v12560 = vadd.f32 0.0, %v12559
  %v12561 = vpop.f32.mrb[0].mxu0
  %12562 = vmatprep.mubr.f32.mxu0 0.0
  %12563 = vmatmul.mubr.f32.gmra.mrb[0].mxu0 %v12186
  %v12564 = vpop.f32.mrb[0].mxu0
  %v12565 = vadd.f32 0.0, %v12564
  %v12566 = vpop.f32.mrb[0].mxu0
  %12567 = vmatprep.mubr.f32.mxu0 0.0
  %12568 = vmatmul.mubr.f32.gmra.mrb[0].mxu0 %v12189
  %v12569 = vpop.f32.mrb[0].mxu0
  %v12570 = vadd.f32 0.0, %v12569
  %v12571 = vpop.f32.mrb[0].mxu0
  %12572 = vmatprep.mubr.f32.mxu0 0.0
  %12573 = vmatmul.mubr.f32.gmra.mrb[0].mxu0 %v12192
  %v12574 = vpop.f32.mrb[0].mxu0
  %v12575 = vadd.f32 0.0, %v12574
  %v12576 = vpop.f32.mrb[0].mxu0
  %12577 = vmatprep.mubr.f32.mxu0 0.0
  %12578 = vmatmul.mubr.f32.gmra.mrb[0].mxu0 %v12195
  %v12579 = vpop.f32.mrb[0].mxu0
  %v12580 = vadd.f32 0.0, %v12579
  %v12581 = vpop.f32.mrb[0].mxu0
  %12582 = vmatprep.mubr.f32.mxu0 0.0
  %12583 = vmatmul.mubr.f32.gmra.mrb[0].mxu0 %v12198
  %v12584 = vpop.f32.mrb[0].mxu0
  %v12585 = vadd.f32 0.0, %v12584
  %v12586 = vpop.f32.mrb[0].mxu0
  %12587 = vdwg.mxu0
  %v12588 = vadd.f32 %v11880, %v12270
  %v12589 = vadd.f32 %v11881, %v12275
  %v12590 = vadd.f32 %v11882, %v12280
  %v12591 = vadd.f32 %v11883, %v12285
  %v12592 = vadd.f32 %v11884, %v12290
  %v12593 = vadd.f32 %v11885, %v12295
  %v12594 = vadd.f32 %v11886, %v12300
  %v12595 = vadd.f32 %v11887, %v12305
  %v12596 = vadd.f32 %v11888, %v12310
  %v12597 = vadd.f32 %v11889, %v12315
  %v12598 = vadd.f32 %v11890, %v12320
  %v12599 = vadd.f32 %v11891, %v12325
  %v12600 = vadd.f32 %v11892, %v12330
  %v12601 = vadd.f32 %v11893, %v12335
  %v12602 = vadd.f32 %v11894, %v12340
  %v12603 = vadd.f32 %v11895, %v12345
  %v12604 = vadd.f32 %v11896, %v12350
  %v12605 = vadd.f32 %v11897, %v12355
  %v12606 = vadd.f32 %v11898, %v12360
  %v12607 = vadd.f32 %v11899, %v12365
  %v12608 = vadd.f32 %v11900, %v12370
  %v12609 = vadd.f32 %v11901, %v12375
  %v12610 = vadd.f32 %v11902, %v12380
  %v12611 = vadd.f32 %v11903, %v12385
  %v12612 = vadd.f32 %v11904, %v12390
  %v12613 = vadd.f32 %v11905, %v12395
  %v12614 = vadd.f32 %v11906, %v12400
  %v12615 = vadd.f32 %v11907, %v12405
  %v12616 = vadd.f32 %v11908, %v12410
  %v12617 = vadd.f32 %v11909, %v12415
  %v12618 = vadd.f32 %v11910, %v12420
  %v12619 = vadd.f32 %v11911, %v12425
  %v12620 = vadd.f32 %v11912, %v12430
  %v12621 = vadd.f32 %v11913, %v12435
  %v12622 = vadd.f32 %v11914, %v12440
  %v12623 = vadd.f32 %v11915, %v12445
  %v12624 = vadd.f32 %v11916, %v12450
  %v12625 = vadd.f32 %v11917, %v12455
  %v12626 = vadd.f32 %v11918, %v12460
  %v12627 = vadd.f32 %v11919, %v12465
  %v12628 = vadd.f32 %v11920, %v12470
  %v12629 = vadd.f32 %v11921, %v12475
  %v12630 = vadd.f32 %v11922, %v12480
  %v12631 = vadd.f32 %v11923, %v12485
  %v12632 = vadd.f32 %v11924, %v12490
  %v12633 = vadd.f32 %v11925, %v12495
  %v12634 = vadd.f32 %v11926, %v12500
  %v12635 = vadd.f32 %v11927, %v12505
  %v12636 = vadd.f32 %v11928, %v12510
  %v12637 = vadd.f32 %v11929, %v12515
  %v12638 = vadd.f32 %v11930, %v12520
  %v12639 = vadd.f32 %v11931, %v12525
  %v12640 = vadd.f32 %v11932, %v12530
  %v12641 = vadd.f32 %v11933, %v12535
  %v12642 = vadd.f32 %v11934, %v12540
  %v12643 = vadd.f32 %v11935, %v12545
  %v12644 = vadd.f32 %v11936, %v12550
  %v12645 = vadd.f32 %v11937, %v12555
  %v12646 = vadd.f32 %v11938, %v12560
  %v12647 = vadd.f32 %v11939, %v12565
  %v12648 = vadd.f32 %v11940, %v12570
  %v12649 = vadd.f32 %v11941, %v12575
  %v12650 = vadd.f32 %v11942, %v12580
  %v12651 = vadd.f32 %v11943, %v12585
  %v12652 = vld [vmem:[%s4382 + $0x2] sm:$0xff]
  %v12653 = vld [vmem:[%s4382 + $0xa] sm:$0xff]
  %v12654 = vld [vmem:[%s4382 + $0x1a] sm:$0xff]
  %v12655 = vld [vmem:[%s4382 + $0x22] sm:$0xff]
  %v12656 = vld [vmem:[%s4382 + $0x32] sm:$0xff]
  %v12657 = vld [vmem:[%s4382 + $0x3a] sm:$0xff]
  %v12658 = vld [vmem:[%s4382 + $0x4a] sm:$0xff]
  %v12659 = vld [vmem:[%s4382 + $0x52] sm:$0xff]
  %v12660 = vld [vmem:[%s4382 + $0x62] sm:$0xff]
  %v12661 = vld [vmem:[%s4382 + $0x6a] sm:$0xff]
  %v12662 = vld [vmem:[%s4382 + $0x7a] sm:$0xff]
  %v12663 = vld [vmem:[%s4382 + $0x82] sm:$0xff]
  %v12664 = vld [vmem:[%s4382 + $0x92] sm:$0xff]
  %v12665 = vld [vmem:[%s4382 + $0x9a] sm:$0xff]
  %v12666 = vld [vmem:[%s4382 + $0xaa] sm:$0xff]
  %v12667 = vld [vmem:[%s4382 + $0xb2] sm:$0xff]
  %v12668 = vld [vmem:[%s4382 + $0xc2] sm:$0xff]
  %v12669 = vld [vmem:[%s4382 + $0xca] sm:$0xff]
  %v12670 = vld [vmem:[%s4382 + $0xda] sm:$0xff]
  %v12671 = vld [vmem:[%s4382 + $0xe2] sm:$0xff]
  %v12672 = vld [vmem:[%s4382 + $0xf2] sm:$0xff]
  %v12673 = vld [vmem:[%s4382 + $0xfa] sm:$0xff]
  %v12674 = vld [vmem:[%s4382 + $0x10a] sm:$0xff]
  %v12675 = vld [vmem:[%s4382 + $0x112] sm:$0xff]
  %v12676 = vld [vmem:[%s4382 + $0x122] sm:$0xff]
  %v12677 = vld [vmem:[%s4382 + $0x12a] sm:$0xff]
  %v12678 = vld [vmem:[%s4382 + $0x13a] sm:$0xff]
  %v12679 = vld [vmem:[%s4382 + $0x142] sm:$0xff]
  %v12680 = vld [vmem:[%s4382 + $0x152] sm:$0xff]
  %v12681 = vld [vmem:[%s4382 + $0x15a] sm:$0xff]
  %v12682 = vld [vmem:[%s4382 + $0x16a] sm:$0xff]
  %v12683 = vld [vmem:[%s4382 + $0x172] sm:$0xff]
  %v12684 = vld [vmem:[%s4382 + $0x1b2] sm:$0xff]
  %v12685 = vld [vmem:[%s4382 + $0x1ba] sm:$0xff]
  %v12686 = vld [vmem:[%s4382 + $0x1ca] sm:$0xff]
  %v12687 = vld [vmem:[%s4382 + $0x1d2] sm:$0xff]
  %v12688 = vld [vmem:[%s4382 + $0x1e2] sm:$0xff]
  %v12689 = vld [vmem:[%s4382 + $0x1ea] sm:$0xff]
  %v12690 = vld [vmem:[%s4382 + $0x1fa] sm:$0xff]
  %v12691 = vld [vmem:[%s4382 + $0x202] sm:$0xff]
  %v12692 = vld [vmem:[%s4382 + $0x212] sm:$0xff]
  %v12693 = vld [vmem:[%s4382 + $0x21a] sm:$0xff]
  %v12694 = vld [vmem:[%s4382 + $0x22a] sm:$0xff]
  %v12695 = vld [vmem:[%s4382 + $0x232] sm:$0xff]
  %v12696 = vld [vmem:[%s4382 + $0x242] sm:$0xff]
  %v12697 = vld [vmem:[%s4382 + $0x24a] sm:$0xff]
  %v12698 = vld [vmem:[%s4382 + $0x25a] sm:$0xff]
  %v12699 = vld [vmem:[%s4382 + $0x262] sm:$0xff]
  %v12700 = vld [vmem:[%s4382 + $0x272] sm:$0xff]
  %v12701 = vld [vmem:[%s4382 + $0x27a] sm:$0xff]
  %v12702 = vld [vmem:[%s4382 + $0x28a] sm:$0xff]
  %v12703 = vld [vmem:[%s4382 + $0x292] sm:$0xff]
  %v12704 = vld [vmem:[%s4382 + $0x2a2] sm:$0xff]
  %v12705 = vld [vmem:[%s4382 + $0x2aa] sm:$0xff]
  %v12706 = vld [vmem:[%s4382 + $0x2ba] sm:$0xff]
  %v12707 = vld [vmem:[%s4382 + $0x2c2] sm:$0xff]
  %v12708 = vld [vmem:[%s4382 + $0x2d2] sm:$0xff]
  %v12709 = vld [vmem:[%s4382 + $0x2da] sm:$0xff]
  %v12710 = vld [vmem:[%s4382 + $0x2ea] sm:$0xff]
  %v12711 = vld [vmem:[%s4382 + $0x2f2] sm:$0xff]
  %v12712 = vld [vmem:[%s4382 + $0x302] sm:$0xff]
  %v12713 = vld [vmem:[%s4382 + $0x30a] sm:$0xff]
  %v12714 = vld [vmem:[%s4382 + $0x31a] sm:$0xff]
  %v12715 = vld [vmem:[%s4382 + $0x322] sm:$0xff]
  %v12717 = vsel %vm44, %v12652, 0
  %v12720 = vsel %vm44, %v12653, 0
  %v12723 = vsel %vm44, %v12654, 0
  %v12726 = vsel %vm44, %v12655, 0
  %v12729 = vsel %vm44, %v12656, 0
  %v12732 = vsel %vm44, %v12657, 0
  %v12735 = vsel %vm44, %v12658, 0
  %v12738 = vsel %vm44, %v12659, 0
  %v12741 = vsel %vm44, %v12660, 0
  %v12744 = vsel %vm44, %v12661, 0
  %v12747 = vsel %vm44, %v12662, 0
  %v12750 = vsel %vm44, %v12663, 0
  %v12753 = vsel %vm44, %v12664, 0
  %v12756 = vsel %vm44, %v12665, 0
  %v12759 = vsel %vm44, %v12666, 0
  %v12762 = vsel %vm44, %v12667, 0
  %v12765 = vsel %vm44, %v12668, 0
  %v12768 = vsel %vm44, %v12669, 0
  %v12771 = vsel %vm44, %v12670, 0
  %v12774 = vsel %vm44, %v12671, 0
  %v12777 = vsel %vm44, %v12672, 0
  %v12780 = vsel %vm44, %v12673, 0
  %v12783 = vsel %vm44, %v12674, 0
  %v12786 = vsel %vm44, %v12675, 0
  %v12789 = vsel %vm44, %v12676, 0
  %v12792 = vsel %vm44, %v12677, 0
  %v12795 = vsel %vm44, %v12678, 0
  %v12798 = vsel %vm44, %v12679, 0
  %v12801 = vsel %vm44, %v12680, 0
  %v12804 = vsel %vm44, %v12681, 0
  %v12807 = vsel %vm44, %v12682, 0
  %v12810 = vsel %vm44, %v12683, 0
  %v12813 = vsel %vm44, %v12684, 0
  %v12816 = vsel %vm44, %v12685, 0
  %v12819 = vsel %vm44, %v12686, 0
  %v12822 = vsel %vm44, %v12687, 0
  %v12825 = vsel %vm44, %v12688, 0
  %v12828 = vsel %vm44, %v12689, 0
  %v12831 = vsel %vm44, %v12690, 0
  %v12834 = vsel %vm44, %v12691, 0
  %v12837 = vsel %vm44, %v12692, 0
  %v12840 = vsel %vm44, %v12693, 0
  %v12843 = vsel %vm44, %v12694, 0
  %v12846 = vsel %vm44, %v12695, 0
  %v12849 = vsel %vm44, %v12696, 0
  %v12852 = vsel %vm44, %v12697, 0
  %v12855 = vsel %vm44, %v12698, 0
  %v12858 = vsel %vm44, %v12699, 0
  %v12861 = vsel %vm44, %v12700, 0
  %v12864 = vsel %vm44, %v12701, 0
  %v12867 = vsel %vm44, %v12702, 0
  %v12870 = vsel %vm44, %v12703, 0
  %v12873 = vsel %vm44, %v12704, 0
  %v12876 = vsel %vm44, %v12705, 0
  %v12879 = vsel %vm44, %v12706, 0
  %v12882 = vsel %vm44, %v12707, 0
  %v12885 = vsel %vm44, %v12708, 0
  %v12888 = vsel %vm44, %v12709, 0
  %v12891 = vsel %vm44, %v12710, 0
  %v12894 = vsel %vm44, %v12711, 0
  %v12897 = vsel %vm44, %v12712, 0
  %v12900 = vsel %vm44, %v12713, 0
  %v12903 = vsel %vm44, %v12714, 0
  %v12906 = vsel %vm44, %v12715, 0
  %v12909 = vsel %vm581, %v43, 0
  %12911 = vmatprep.subr.mxu0 0.0
  %12912 = vmatpush1.msra.mxu0 %v12909
  %12913 = vmatprep.subr.mxu0 0.0
  %12914 = vmatpush1.msra.mxu0 0.0
  %12915 = vmatprep.subr.mxu0 0.0
  %12916 = vmatpush1.msra.mxu0 0.0
  %12917 = vmatprep.subr.mxu0 0.0
  %12918 = vmatpush1.msra.mxu0 0.0
  %12919 = vmatprep.subr.mxu0 0.0
  %12920 = vmatpush1.msra.mxu0 0.0
  %12921 = vmatprep.subr.mxu0 0.0
  %12922 = vmatpush1.msra.mxu0 0.0
  %12923 = vmatprep.subr.mxu0 0.0
  %12924 = vmatpush1.msra.mxu0 0.0
  %12925 = vmatprep.subr.mxu0 0.0
  %12926 = vmatpush1.msra.mxu0 0.0
  %12927 = vmatprep.subr.mxu0 0.0
  %12928 = vmatpush1.msra.mxu0 0.0
  %12929 = vmatprep.subr.mxu0 0.0
  %12930 = vmatpush1.msra.mxu0 0.0
  %12931 = vmatprep.subr.mxu0 0.0
  %12932 = vmatpush1.msra.mxu0 0.0
  %12933 = vmatprep.subr.mxu0 0.0
  %12934 = vmatpush1.msra.mxu0 0.0
  %12935 = vmatprep.subr.mxu0 0.0
  %12936 = vmatpush1.msra.mxu0 0.0
  %12937 = vmatprep.subr.mxu0 0.0
  %12938 = vmatpush1.msra.mxu0 0.0
  %12939 = vmatprep.subr.mxu0 0.0
  %12940 = vmatpush1.msra.mxu0 0.0
  %12941 = vmatprep.subr.mxu0 0.0
  %12942 = vmatpush1.msra.mxu0 0.0
  %12943 = vmatprep.subr.mxu0 0.0
  %12944 = vmatpush1.msra.mxu0 0.0
  %12945 = vmatprep.subr.mxu0 0.0
  %12946 = vmatpush1.msra.mxu0 0.0
  %12947 = vmatprep.subr.mxu0 0.0
  %12948 = vmatpush1.msra.mxu0 0.0
  %12949 = vmatprep.subr.mxu0 0.0
  %12950 = vmatpush1.msra.mxu0 0.0
  %12951 = vmatprep.subr.mxu0 0.0
  %12952 = vmatpush1.msra.mxu0 0.0
  %12953 = vmatprep.subr.mxu0 0.0
  %12954 = vmatpush1.msra.mxu0 0.0
  %12955 = vmatprep.subr.mxu0 0.0
  %12956 = vmatpush1.msra.mxu0 0.0
  %12957 = vmatprep.subr.mxu0 0.0
  %12958 = vmatpush1.msra.mxu0 0.0
  %12959 = vmatprep.subr.mxu0 0.0
  %12960 = vmatpush1.msra.mxu0 0.0
  %12961 = vmatprep.subr.mxu0 0.0
  %12962 = vmatpush1.msra.mxu0 0.0
  %12963 = vmatprep.subr.mxu0 0.0
  %12964 = vmatpush1.msra.mxu0 0.0
  %12965 = vmatprep.subr.mxu0 0.0
  %12966 = vmatpush1.msra.mxu0 0.0
  %12967 = vmatprep.subr.mxu0 0.0
  %12968 = vmatpush1.msra.mxu0 0.0
  %12969 = vmatprep.subr.mxu0 0.0
  %12970 = vmatpush1.msra.mxu0 0.0
  %12971 = vmatprep.subr.mxu0 0.0
  %12972 = vmatpush1.msra.mxu0 0.0
  %12973 = vmatprep.subr.mxu0 0.0
  %12974 = vmatpush1.msra.mxu0 0.0
  %12975 = vmatprep.mubr.f32.mxu0 0.0
  %12976 = vmatmul.mubr.f32.gmra.mrb[0].mxu0 %v12717
  %v12977 = vpop.f32.mrb[0].mxu0
  %v12978 = vadd.f32 0.0, %v12977
  %v12979 = vpop.f32.mrb[0].mxu0
  %12980 = vmatprep.mubr.f32.mxu0 0.0
  %12981 = vmatmul.mubr.f32.gmra.mrb[0].mxu0 %v12720
  %v12982 = vpop.f32.mrb[0].mxu0
  %v12983 = vadd.f32 0.0, %v12982
  %v12984 = vpop.f32.mrb[0].mxu0
  %12985 = vmatprep.mubr.f32.mxu0 0.0
  %12986 = vmatmul.mubr.f32.gmra.mrb[0].mxu0 %v12723
  %v12987 = vpop.f32.mrb[0].mxu0
  %v12988 = vadd.f32 0.0, %v12987
  %v12989 = vpop.f32.mrb[0].mxu0
  %12990 = vmatprep.mubr.f32.mxu0 0.0
  %12991 = vmatmul.mubr.f32.gmra.mrb[0].mxu0 %v12726
  %v12992 = vpop.f32.mrb[0].mxu0
  %v12993 = vadd.f32 0.0, %v12992
  %v12994 = vpop.f32.mrb[0].mxu0
  %12995 = vmatprep.mubr.f32.mxu0 0.0
  %12996 = vmatmul.mubr.f32.gmra.mrb[0].mxu0 %v12729
  %v12997 = vpop.f32.mrb[0].mxu0
  %v12998 = vadd.f32 0.0, %v12997
  %v12999 = vpop.f32.mrb[0].mxu0
  %13000 = vmatprep.mubr.f32.mxu0 0.0
  %13001 = vmatmul.mubr.f32.gmra.mrb[0].mxu0 %v12732
  %v13002 = vpop.f32.mrb[0].mxu0
  %v13003 = vadd.f32 0.0, %v13002
  %v13004 = vpop.f32.mrb[0].mxu0
  %13005 = vmatprep.mubr.f32.mxu0 0.0
  %13006 = vmatmul.mubr.f32.gmra.mrb[0].mxu0 %v12735
  %v13007 = vpop.f32.mrb[0].mxu0
  %v13008 = vadd.f32 0.0, %v13007
  %v13009 = vpop.f32.mrb[0].mxu0
  %13010 = vmatprep.mubr.f32.mxu0 0.0
  %13011 = vmatmul.mubr.f32.gmra.mrb[0].mxu0 %v12738
  %v13012 = vpop.f32.mrb[0].mxu0
  %v13013 = vadd.f32 0.0, %v13012
  %v13014 = vpop.f32.mrb[0].mxu0
  %13015 = vmatprep.mubr.f32.mxu0 0.0
  %13016 = vmatmul.mubr.f32.gmra.mrb[0].mxu0 %v12741
  %v13017 = vpop.f32.mrb[0].mxu0
  %v13018 = vadd.f32 0.0, %v13017
  %v13019 = vpop.f32.mrb[0].mxu0
  %13020 = vmatprep.mubr.f32.mxu0 0.0
  %13021 = vmatmul.mubr.f32.gmra.mrb[0].mxu0 %v12744
  %v13022 = vpop.f32.mrb[0].mxu0
  %v13023 = vadd.f32 0.0, %v13022
  %v13024 = vpop.f32.mrb[0].mxu0
  %13025 = vmatprep.mubr.f32.mxu0 0.0
  %13026 = vmatmul.mubr.f32.gmra.mrb[0].mxu0 %v12747
  %v13027 = vpop.f32.mrb[0].mxu0
  %v13028 = vadd.f32 0.0, %v13027
  %v13029 = vpop.f32.mrb[0].mxu0
  %13030 = vmatprep.mubr.f32.mxu0 0.0
  %13031 = vmatmul.mubr.f32.gmra.mrb[0].mxu0 %v12750
  %v13032 = vpop.f32.mrb[0].mxu0
  %v13033 = vadd.f32 0.0, %v13032
  %v13034 = vpop.f32.mrb[0].mxu0
  %13035 = vmatprep.mubr.f32.mxu0 0.0
  %13036 = vmatmul.mubr.f32.gmra.mrb[0].mxu0 %v12753
  %v13037 = vpop.f32.mrb[0].mxu0
  %v13038 = vadd.f32 0.0, %v13037
  %v13039 = vpop.f32.mrb[0].mxu0
  %13040 = vmatprep.mubr.f32.mxu0 0.0
  %13041 = vmatmul.mubr.f32.gmra.mrb[0].mxu0 %v12756
  %v13042 = vpop.f32.mrb[0].mxu0
  %v13043 = vadd.f32 0.0, %v13042
  %v13044 = vpop.f32.mrb[0].mxu0
  %13045 = vmatprep.mubr.f32.mxu0 0.0
  %13046 = vmatmul.mubr.f32.gmra.mrb[0].mxu0 %v12759
  %v13047 = vpop.f32.mrb[0].mxu0
  %v13048 = vadd.f32 0.0, %v13047
  %v13049 = vpop.f32.mrb[0].mxu0
  %13050 = vmatprep.mubr.f32.mxu0 0.0
  %13051 = vmatmul.mubr.f32.gmra.mrb[0].mxu0 %v12762
  %v13052 = vpop.f32.mrb[0].mxu0
  %v13053 = vadd.f32 0.0, %v13052
  %v13054 = vpop.f32.mrb[0].mxu0
  %13055 = vmatprep.mubr.f32.mxu0 0.0
  %13056 = vmatmul.mubr.f32.gmra.mrb[0].mxu0 %v12765
  %v13057 = vpop.f32.mrb[0].mxu0
  %v13058 = vadd.f32 0.0, %v13057
  %v13059 = vpop.f32.mrb[0].mxu0
  %13060 = vmatprep.mubr.f32.mxu0 0.0
  %13061 = vmatmul.mubr.f32.gmra.mrb[0].mxu0 %v12768
  %v13062 = vpop.f32.mrb[0].mxu0
  %v13063 = vadd.f32 0.0, %v13062
  %v13064 = vpop.f32.mrb[0].mxu0
  %13065 = vmatprep.mubr.f32.mxu0 0.0
  %13066 = vmatmul.mubr.f32.gmra.mrb[0].mxu0 %v12771
  %v13067 = vpop.f32.mrb[0].mxu0
  %v13068 = vadd.f32 0.0, %v13067
  %v13069 = vpop.f32.mrb[0].mxu0
  %13070 = vmatprep.mubr.f32.mxu0 0.0
  %13071 = vmatmul.mubr.f32.gmra.mrb[0].mxu0 %v12774
  %v13072 = vpop.f32.mrb[0].mxu0
  %v13073 = vadd.f32 0.0, %v13072
  %v13074 = vpop.f32.mrb[0].mxu0
  %13075 = vmatprep.mubr.f32.mxu0 0.0
  %13076 = vmatmul.mubr.f32.gmra.mrb[0].mxu0 %v12777
  %v13077 = vpop.f32.mrb[0].mxu0
  %v13078 = vadd.f32 0.0, %v13077
  %v13079 = vpop.f32.mrb[0].mxu0
  %13080 = vmatprep.mubr.f32.mxu0 0.0
  %13081 = vmatmul.mubr.f32.gmra.mrb[0].mxu0 %v12780
  %v13082 = vpop.f32.mrb[0].mxu0
  %v13083 = vadd.f32 0.0, %v13082
  %v13084 = vpop.f32.mrb[0].mxu0
  %13085 = vmatprep.mubr.f32.mxu0 0.0
  %13086 = vmatmul.mubr.f32.gmra.mrb[0].mxu0 %v12783
  %v13087 = vpop.f32.mrb[0].mxu0
  %v13088 = vadd.f32 0.0, %v13087
  %v13089 = vpop.f32.mrb[0].mxu0
  %13090 = vmatprep.mubr.f32.mxu0 0.0
  %13091 = vmatmul.mubr.f32.gmra.mrb[0].mxu0 %v12786
  %v13092 = vpop.f32.mrb[0].mxu0
  %v13093 = vadd.f32 0.0, %v13092
  %v13094 = vpop.f32.mrb[0].mxu0
  %13095 = vmatprep.mubr.f32.mxu0 0.0
  %13096 = vmatmul.mubr.f32.gmra.mrb[0].mxu0 %v12789
  %v13097 = vpop.f32.mrb[0].mxu0
  %v13098 = vadd.f32 0.0, %v13097
  %v13099 = vpop.f32.mrb[0].mxu0
  %13100 = vmatprep.mubr.f32.mxu0 0.0
  %13101 = vmatmul.mubr.f32.gmra.mrb[0].mxu0 %v12792
  %v13102 = vpop.f32.mrb[0].mxu0
  %v13103 = vadd.f32 0.0, %v13102
  %v13104 = vpop.f32.mrb[0].mxu0
  %13105 = vmatprep.mubr.f32.mxu0 0.0
  %13106 = vmatmul.mubr.f32.gmra.mrb[0].mxu0 %v12795
  %v13107 = vpop.f32.mrb[0].mxu0
  %v13108 = vadd.f32 0.0, %v13107
  %v13109 = vpop.f32.mrb[0].mxu0
  %13110 = vmatprep.mubr.f32.mxu0 0.0
  %13111 = vmatmul.mubr.f32.gmra.mrb[0].mxu0 %v12798
  %v13112 = vpop.f32.mrb[0].mxu0
  %v13113 = vadd.f32 0.0, %v13112
  %v13114 = vpop.f32.mrb[0].mxu0
  %13115 = vmatprep.mubr.f32.mxu0 0.0
  %13116 = vmatmul.mubr.f32.gmra.mrb[0].mxu0 %v12801
  %v13117 = vpop.f32.mrb[0].mxu0
  %v13118 = vadd.f32 0.0, %v13117
  %v13119 = vpop.f32.mrb[0].mxu0
  %13120 = vmatprep.mubr.f32.mxu0 0.0
  %13121 = vmatmul.mubr.f32.gmra.mrb[0].mxu0 %v12804
  %v13122 = vpop.f32.mrb[0].mxu0
  %v13123 = vadd.f32 0.0, %v13122
  %v13124 = vpop.f32.mrb[0].mxu0
  %13125 = vmatprep.mubr.f32.mxu0 0.0
  %13126 = vmatmul.mubr.f32.gmra.mrb[0].mxu0 %v12807
  %v13127 = vpop.f32.mrb[0].mxu0
  %v13128 = vadd.f32 0.0, %v13127
  %v13129 = vpop.f32.mrb[0].mxu0
  %13130 = vmatprep.mubr.f32.mxu0 0.0
  %13131 = vmatmul.mubr.f32.gmra.mrb[0].mxu0 %v12810
  %v13132 = vpop.f32.mrb[0].mxu0
  %v13133 = vadd.f32 0.0, %v13132
  %v13134 = vpop.f32.mrb[0].mxu0
  %13135 = vmatprep.mubr.f32.mxu0 0.0
  %13136 = vmatmul.mubr.f32.gmra.mrb[0].mxu0 %v12813
  %v13137 = vpop.f32.mrb[0].mxu0
  %v13138 = vadd.f32 0.0, %v13137
  %v13139 = vpop.f32.mrb[0].mxu0
  %13140 = vmatprep.mubr.f32.mxu0 0.0
  %13141 = vmatmul.mubr.f32.gmra.mrb[0].mxu0 %v12816
  %v13142 = vpop.f32.mrb[0].mxu0
  %v13143 = vadd.f32 0.0, %v13142
  %v13144 = vpop.f32.mrb[0].mxu0
  %13145 = vmatprep.mubr.f32.mxu0 0.0
  %13146 = vmatmul.mubr.f32.gmra.mrb[0].mxu0 %v12819
  %v13147 = vpop.f32.mrb[0].mxu0
  %v13148 = vadd.f32 0.0, %v13147
  %v13149 = vpop.f32.mrb[0].mxu0
  %13150 = vmatprep.mubr.f32.mxu0 0.0
  %13151 = vmatmul.mubr.f32.gmra.mrb[0].mxu0 %v12822
  %v13152 = vpop.f32.mrb[0].mxu0
  %v13153 = vadd.f32 0.0, %v13152
  %v13154 = vpop.f32.mrb[0].mxu0
  %13155 = vmatprep.mubr.f32.mxu0 0.0
  %13156 = vmatmul.mubr.f32.gmra.mrb[0].mxu0 %v12825
  %v13157 = vpop.f32.mrb[0].mxu0
  %v13158 = vadd.f32 0.0, %v13157
  %v13159 = vpop.f32.mrb[0].mxu0
  %13160 = vmatprep.mubr.f32.mxu0 0.0
  %13161 = vmatmul.mubr.f32.gmra.mrb[0].mxu0 %v12828
  %v13162 = vpop.f32.mrb[0].mxu0
  %v13163 = vadd.f32 0.0, %v13162
  %v13164 = vpop.f32.mrb[0].mxu0
  %13165 = vmatprep.mubr.f32.mxu0 0.0
  %13166 = vmatmul.mubr.f32.gmra.mrb[0].mxu0 %v12831
  %v13167 = vpop.f32.mrb[0].mxu0
  %v13168 = vadd.f32 0.0, %v13167
  %v13169 = vpop.f32.mrb[0].mxu0
  %13170 = vmatprep.mubr.f32.mxu0 0.0
  %13171 = vmatmul.mubr.f32.gmra.mrb[0].mxu0 %v12834
  %v13172 = vpop.f32.mrb[0].mxu0
  %v13173 = vadd.f32 0.0, %v13172
  %v13174 = vpop.f32.mrb[0].mxu0
  %13175 = vmatprep.mubr.f32.mxu0 0.0
  %13176 = vmatmul.mubr.f32.gmra.mrb[0].mxu0 %v12837
  %v13177 = vpop.f32.mrb[0].mxu0
  %v13178 = vadd.f32 0.0, %v13177
  %v13179 = vpop.f32.mrb[0].mxu0
  %13180 = vmatprep.mubr.f32.mxu0 0.0
  %13181 = vmatmul.mubr.f32.gmra.mrb[0].mxu0 %v12840
  %v13182 = vpop.f32.mrb[0].mxu0
  %v13183 = vadd.f32 0.0, %v13182
  %v13184 = vpop.f32.mrb[0].mxu0
  %13185 = vmatprep.mubr.f32.mxu0 0.0
  %13186 = vmatmul.mubr.f32.gmra.mrb[0].mxu0 %v12843
  %v13187 = vpop.f32.mrb[0].mxu0
  %v13188 = vadd.f32 0.0, %v13187
  %v13189 = vpop.f32.mrb[0].mxu0
  %13190 = vmatprep.mubr.f32.mxu0 0.0
  %13191 = vmatmul.mubr.f32.gmra.mrb[0].mxu0 %v12846
  %v13192 = vpop.f32.mrb[0].mxu0
  %v13193 = vadd.f32 0.0, %v13192
  %v13194 = vpop.f32.mrb[0].mxu0
  %13195 = vmatprep.mubr.f32.mxu0 0.0
  %13196 = vmatmul.mubr.f32.gmra.mrb[0].mxu0 %v12849
  %v13197 = vpop.f32.mrb[0].mxu0
  %v13198 = vadd.f32 0.0, %v13197
  %v13199 = vpop.f32.mrb[0].mxu0
  %13200 = vmatprep.mubr.f32.mxu0 0.0
  %13201 = vmatmul.mubr.f32.gmra.mrb[0].mxu0 %v12852
  %v13202 = vpop.f32.mrb[0].mxu0
  %v13203 = vadd.f32 0.0, %v13202
  %v13204 = vpop.f32.mrb[0].mxu0
  %13205 = vmatprep.mubr.f32.mxu0 0.0
  %13206 = vmatmul.mubr.f32.gmra.mrb[0].mxu0 %v12855
  %v13207 = vpop.f32.mrb[0].mxu0
  %v13208 = vadd.f32 0.0, %v13207
  %v13209 = vpop.f32.mrb[0].mxu0
  %13210 = vmatprep.mubr.f32.mxu0 0.0
  %13211 = vmatmul.mubr.f32.gmra.mrb[0].mxu0 %v12858
  %v13212 = vpop.f32.mrb[0].mxu0
  %v13213 = vadd.f32 0.0, %v13212
  %v13214 = vpop.f32.mrb[0].mxu0
  %13215 = vmatprep.mubr.f32.mxu0 0.0
  %13216 = vmatmul.mubr.f32.gmra.mrb[0].mxu0 %v12861
  %v13217 = vpop.f32.mrb[0].mxu0
  %v13218 = vadd.f32 0.0, %v13217
  %v13219 = vpop.f32.mrb[0].mxu0
  %13220 = vmatprep.mubr.f32.mxu0 0.0
  %13221 = vmatmul.mubr.f32.gmra.mrb[0].mxu0 %v12864
  %v13222 = vpop.f32.mrb[0].mxu0
  %v13223 = vadd.f32 0.0, %v13222
  %v13224 = vpop.f32.mrb[0].mxu0
  %13225 = vmatprep.mubr.f32.mxu0 0.0
  %13226 = vmatmul.mubr.f32.gmra.mrb[0].mxu0 %v12867
  %v13227 = vpop.f32.mrb[0].mxu0
  %v13228 = vadd.f32 0.0, %v13227
  %v13229 = vpop.f32.mrb[0].mxu0
  %13230 = vmatprep.mubr.f32.mxu0 0.0
  %13231 = vmatmul.mubr.f32.gmra.mrb[0].mxu0 %v12870
  %v13232 = vpop.f32.mrb[0].mxu0
  %v13233 = vadd.f32 0.0, %v13232
  %v13234 = vpop.f32.mrb[0].mxu0
  %13235 = vmatprep.mubr.f32.mxu0 0.0
  %13236 = vmatmul.mubr.f32.gmra.mrb[0].mxu0 %v12873
  %v13237 = vpop.f32.mrb[0].mxu0
  %v13238 = vadd.f32 0.0, %v13237
  %v13239 = vpop.f32.mrb[0].mxu0
  %13240 = vmatprep.mubr.f32.mxu0 0.0
  %13241 = vmatmul.mubr.f32.gmra.mrb[0].mxu0 %v12876
  %v13242 = vpop.f32.mrb[0].mxu0
  %v13243 = vadd.f32 0.0, %v13242
  %v13244 = vpop.f32.mrb[0].mxu0
  %13245 = vmatprep.mubr.f32.mxu0 0.0
  %13246 = vmatmul.mubr.f32.gmra.mrb[0].mxu0 %v12879
  %v13247 = vpop.f32.mrb[0].mxu0
  %v13248 = vadd.f32 0.0, %v13247
  %v13249 = vpop.f32.mrb[0].mxu0
  %13250 = vmatprep.mubr.f32.mxu0 0.0
  %13251 = vmatmul.mubr.f32.gmra.mrb[0].mxu0 %v12882
  %v13252 = vpop.f32.mrb[0].mxu0
  %v13253 = vadd.f32 0.0, %v13252
  %v13254 = vpop.f32.mrb[0].mxu0
  %13255 = vmatprep.mubr.f32.mxu0 0.0
  %13256 = vmatmul.mubr.f32.gmra.mrb[0].mxu0 %v12885
  %v13257 = vpop.f32.mrb[0].mxu0
  %v13258 = vadd.f32 0.0, %v13257
  %v13259 = vpop.f32.mrb[0].mxu0
  %13260 = vmatprep.mubr.f32.mxu0 0.0
  %13261 = vmatmul.mubr.f32.gmra.mrb[0].mxu0 %v12888
  %v13262 = vpop.f32.mrb[0].mxu0
  %v13263 = vadd.f32 0.0, %v13262
  %v13264 = vpop.f32.mrb[0].mxu0
  %13265 = vmatprep.mubr.f32.mxu0 0.0
  %13266 = vmatmul.mubr.f32.gmra.mrb[0].mxu0 %v12891
  %v13267 = vpop.f32.mrb[0].mxu0
  %v13268 = vadd.f32 0.0, %v13267
  %v13269 = vpop.f32.mrb[0].mxu0
  %13270 = vmatprep.mubr.f32.mxu0 0.0
  %13271 = vmatmul.mubr.f32.gmra.mrb[0].mxu0 %v12894
  %v13272 = vpop.f32.mrb[0].mxu0
  %v13273 = vadd.f32 0.0, %v13272
  %v13274 = vpop.f32.mrb[0].mxu0
  %13275 = vmatprep.mubr.f32.mxu0 0.0
  %13276 = vmatmul.mubr.f32.gmra.mrb[0].mxu0 %v12897
  %v13277 = vpop.f32.mrb[0].mxu0
  %v13278 = vadd.f32 0.0, %v13277
  %v13279 = vpop.f32.mrb[0].mxu0
  %13280 = vmatprep.mubr.f32.mxu0 0.0
  %13281 = vmatmul.mubr.f32.gmra.mrb[0].mxu0 %v12900
  %v13282 = vpop.f32.mrb[0].mxu0
  %v13283 = vadd.f32 0.0, %v13282
  %v13284 = vpop.f32.mrb[0].mxu0
  %13285 = vmatprep.mubr.f32.mxu0 0.0
  %13286 = vmatmul.mubr.f32.gmra.mrb[0].mxu0 %v12903
  %v13287 = vpop.f32.mrb[0].mxu0
  %v13288 = vadd.f32 0.0, %v13287
  %v13289 = vpop.f32.mrb[0].mxu0
  %13290 = vmatprep.mubr.f32.mxu0 0.0
  %13291 = vmatmul.mubr.f32.gmra.mrb[0].mxu0 %v12906
  %v13292 = vpop.f32.mrb[0].mxu0
  %v13293 = vadd.f32 0.0, %v13292
  %v13294 = vpop.f32.mrb[0].mxu0
  %13295 = vdwg.mxu0
  %v13296 = vadd.f32 %v12588, %v12978
  %v13297 = vadd.f32 %v12589, %v12983
  %v13298 = vadd.f32 %v12590, %v12988
  %v13299 = vadd.f32 %v12591, %v12993
  %v13300 = vadd.f32 %v12592, %v12998
  %v13301 = vadd.f32 %v12593, %v13003
  %v13302 = vadd.f32 %v12594, %v13008
  %v13303 = vadd.f32 %v12595, %v13013
  %v13304 = vadd.f32 %v12596, %v13018
  %v13305 = vadd.f32 %v12597, %v13023
  %v13306 = vadd.f32 %v12598, %v13028
  %v13307 = vadd.f32 %v12599, %v13033
  %v13308 = vadd.f32 %v12600, %v13038
  %v13309 = vadd.f32 %v12601, %v13043
  %v13310 = vadd.f32 %v12602, %v13048
  %v13311 = vadd.f32 %v12603, %v13053
  %v13312 = vadd.f32 %v12604, %v13058
  %v13313 = vadd.f32 %v12605, %v13063
  %v13314 = vadd.f32 %v12606, %v13068
  %v13315 = vadd.f32 %v12607, %v13073
  %v13316 = vadd.f32 %v12608, %v13078
  %v13317 = vadd.f32 %v12609, %v13083
  %v13318 = vadd.f32 %v12610, %v13088
  %v13319 = vadd.f32 %v12611, %v13093
  %v13320 = vadd.f32 %v12612, %v13098
  %v13321 = vadd.f32 %v12613, %v13103
  %v13322 = vadd.f32 %v12614, %v13108
  %v13323 = vadd.f32 %v12615, %v13113
  %v13324 = vadd.f32 %v12616, %v13118
  %v13325 = vadd.f32 %v12617, %v13123
  %v13326 = vadd.f32 %v12618, %v13128
  %v13327 = vadd.f32 %v12619, %v13133
  %v13328 = vadd.f32 %v12620, %v13138
  %v13329 = vadd.f32 %v12621, %v13143
  %v13330 = vadd.f32 %v12622, %v13148
  %v13331 = vadd.f32 %v12623, %v13153
  %v13332 = vadd.f32 %v12624, %v13158
  %v13333 = vadd.f32 %v12625, %v13163
  %v13334 = vadd.f32 %v12626, %v13168
  %v13335 = vadd.f32 %v12627, %v13173
  %v13336 = vadd.f32 %v12628, %v13178
  %v13337 = vadd.f32 %v12629, %v13183
  %v13338 = vadd.f32 %v12630, %v13188
  %v13339 = vadd.f32 %v12631, %v13193
  %v13340 = vadd.f32 %v12632, %v13198
  %v13341 = vadd.f32 %v12633, %v13203
  %v13342 = vadd.f32 %v12634, %v13208
  %v13343 = vadd.f32 %v12635, %v13213
  %v13344 = vadd.f32 %v12636, %v13218
  %v13345 = vadd.f32 %v12637, %v13223
  %v13346 = vadd.f32 %v12638, %v13228
  %v13347 = vadd.f32 %v12639, %v13233
  %v13348 = vadd.f32 %v12640, %v13238
  %v13349 = vadd.f32 %v12641, %v13243
  %v13350 = vadd.f32 %v12642, %v13248
  %v13351 = vadd.f32 %v12643, %v13253
  %v13352 = vadd.f32 %v12644, %v13258
  %v13353 = vadd.f32 %v12645, %v13263
  %v13354 = vadd.f32 %v12646, %v13268
  %v13355 = vadd.f32 %v12647, %v13273
  %v13356 = vadd.f32 %v12648, %v13278
  %v13357 = vadd.f32 %v12649, %v13283
  %v13358 = vadd.f32 %v12650, %v13288
  %v13359 = vadd.f32 %v12651, %v13293
  %v13360 = vsel %vm44, %v13296, 0.0
  %v13361 = vsel %vm44, %v13297, 0.0
  %v13362 = vadd.f32 %v13360, %v13361
  %v13363 = vsel %vm44, %v13298, 0.0
  %v13364 = vadd.f32 %v13362, %v13363
  %v13365 = vsel %vm44, %v13299, 0.0
  %v13366 = vadd.f32 %v13364, %v13365
  %v13367 = vsel %vm44, %v13300, 0.0
  %v13368 = vadd.f32 %v13366, %v13367
  %v13369 = vsel %vm44, %v13301, 0.0
  %v13370 = vadd.f32 %v13368, %v13369
  %v13371 = vsel %vm44, %v13302, 0.0
  %v13372 = vadd.f32 %v13370, %v13371
  %v13373 = vsel %vm44, %v13303, 0.0
  %v13374 = vadd.f32 %v13372, %v13373
  %v13375 = vsel %vm44, %v13304, 0.0
  %v13376 = vadd.f32 %v13374, %v13375
  %v13377 = vsel %vm44, %v13305, 0.0
  %v13378 = vadd.f32 %v13376, %v13377
  %v13379 = vsel %vm44, %v13306, 0.0
  %v13380 = vadd.f32 %v13378, %v13379
  %v13381 = vsel %vm44, %v13307, 0.0
  %v13382 = vadd.f32 %v13380, %v13381
  %v13383 = vsel %vm44, %v13308, 0.0
  %v13384 = vadd.f32 %v13382, %v13383
  %v13385 = vsel %vm44, %v13309, 0.0
  %v13386 = vadd.f32 %v13384, %v13385
  %v13387 = vsel %vm44, %v13310, 0.0
  %v13388 = vadd.f32 %v13386, %v13387
  %v13389 = vsel %vm44, %v13311, 0.0
  %v13390 = vadd.f32 %v13388, %v13389
  %v13391 = vsel %vm44, %v13312, 0.0
  %v13392 = vadd.f32 %v13390, %v13391
  %v13393 = vsel %vm44, %v13313, 0.0
  %v13394 = vadd.f32 %v13392, %v13393
  %v13395 = vsel %vm44, %v13314, 0.0
  %v13396 = vadd.f32 %v13394, %v13395
  %v13397 = vsel %vm44, %v13315, 0.0
  %v13398 = vadd.f32 %v13396, %v13397
  %v13399 = vsel %vm44, %v13316, 0.0
  %v13400 = vadd.f32 %v13398, %v13399
  %v13401 = vsel %vm44, %v13317, 0.0
  %v13402 = vadd.f32 %v13400, %v13401
  %v13403 = vsel %vm44, %v13318, 0.0
  %v13404 = vadd.f32 %v13402, %v13403
  %v13405 = vsel %vm44, %v13319, 0.0
  %v13406 = vadd.f32 %v13404, %v13405
  %v13407 = vsel %vm44, %v13320, 0.0
  %v13408 = vadd.f32 %v13406, %v13407
  %v13409 = vsel %vm44, %v13321, 0.0
  %v13410 = vadd.f32 %v13408, %v13409
  %v13411 = vsel %vm44, %v13322, 0.0
  %v13412 = vadd.f32 %v13410, %v13411
  %v13413 = vsel %vm44, %v13323, 0.0
  %v13414 = vadd.f32 %v13412, %v13413
  %v13415 = vsel %vm44, %v13324, 0.0
  %v13416 = vadd.f32 %v13414, %v13415
  %v13417 = vsel %vm44, %v13325, 0.0
  %v13418 = vadd.f32 %v13416, %v13417
  %v13419 = vsel %vm44, %v13326, 0.0
  %v13420 = vadd.f32 %v13418, %v13419
  %v13421 = vsel %vm44, %v13327, 0.0
  %v13422 = vadd.f32 %v13420, %v13421
  %v13423 = vsel %vm44, %v13328, 0.0
  %v13424 = vadd.f32 %v13422, %v13423
  %v13425 = vsel %vm44, %v13329, 0.0
  %v13426 = vadd.f32 %v13424, %v13425
  %v13427 = vsel %vm44, %v13330, 0.0
  %v13428 = vadd.f32 %v13426, %v13427
  %v13429 = vsel %vm44, %v13331, 0.0
  %v13430 = vadd.f32 %v13428, %v13429
  %v13431 = vsel %vm44, %v13332, 0.0
  %v13432 = vadd.f32 %v13430, %v13431
  %v13433 = vsel %vm44, %v13333, 0.0
  %v13434 = vadd.f32 %v13432, %v13433
  %v13435 = vsel %vm44, %v13334, 0.0
  %v13436 = vadd.f32 %v13434, %v13435
  %v13437 = vsel %vm44, %v13335, 0.0
  %v13438 = vadd.f32 %v13436, %v13437
  %v13439 = vsel %vm44, %v13336, 0.0
  %v13440 = vadd.f32 %v13438, %v13439
  %v13441 = vsel %vm44, %v13337, 0.0
  %v13442 = vadd.f32 %v13440, %v13441
  %v13443 = vsel %vm44, %v13338, 0.0
  %v13444 = vadd.f32 %v13442, %v13443
  %v13445 = vsel %vm44, %v13339, 0.0
  %v13446 = vadd.f32 %v13444, %v13445
  %v13447 = vsel %vm44, %v13340, 0.0
  %v13448 = vadd.f32 %v13446, %v13447
  %v13449 = vsel %vm44, %v13341, 0.0
  %v13450 = vadd.f32 %v13448, %v13449
  %v13451 = vsel %vm44, %v13342, 0.0
  %v13452 = vadd.f32 %v13450, %v13451
  %v13453 = vsel %vm44, %v13343, 0.0
  %v13454 = vadd.f32 %v13452, %v13453
  %v13455 = vsel %vm44, %v13344, 0.0
  %v13456 = vadd.f32 %v13454, %v13455
  %v13457 = vsel %vm44, %v13345, 0.0
  %v13458 = vadd.f32 %v13456, %v13457
  %v13459 = vsel %vm44, %v13346, 0.0
  %v13460 = vadd.f32 %v13458, %v13459
  %v13461 = vsel %vm44, %v13347, 0.0
  %v13462 = vadd.f32 %v13460, %v13461
  %v13463 = vsel %vm44, %v13348, 0.0
  %v13464 = vadd.f32 %v13462, %v13463
  %v13465 = vsel %vm44, %v13349, 0.0
  %v13466 = vadd.f32 %v13464, %v13465
  %v13467 = vsel %vm44, %v13350, 0.0
  %v13468 = vadd.f32 %v13466, %v13467
  %v13469 = vsel %vm44, %v13351, 0.0
  %v13470 = vadd.f32 %v13468, %v13469
  %v13471 = vsel %vm44, %v13352, 0.0
  %v13472 = vadd.f32 %v13470, %v13471
  %v13473 = vsel %vm44, %v13353, 0.0
  %v13474 = vadd.f32 %v13472, %v13473
  %v13475 = vsel %vm44, %v13354, 0.0
  %v13476 = vadd.f32 %v13474, %v13475
  %v13477 = vsel %vm44, %v13355, 0.0
  %v13478 = vadd.f32 %v13476, %v13477
  %v13479 = vsel %vm44, %v13356, 0.0
  %v13480 = vadd.f32 %v13478, %v13479
  %v13481 = vsel %vm44, %v13357, 0.0
  %v13482 = vadd.f32 %v13480, %v13481
  %v13483 = vsel %vm44, %v13358, 0.0
  %v13484 = vadd.f32 %v13482, %v13483
  %v13485 = vsel %vm44, %v13359, 0.0
  %v13486 = vadd.f32 %v13484, %v13485
  %v13487 = vrot.slane %v13486, 4
  %v13488 = vadd.f32 %v13486, %v13487
  %v13489 = vrot.slane %v13488, 2
  %v13490 = vadd.f32 %v13488, %v13489
  %v13491 = vrot.slane %v13490, 1
  %v13492 = vadd.f32 %v13490, %v13491
  %v13493 = vmul.f32 %v13296, %v13296
  %v13494 = vmul.f32 %v13297, %v13297
  %v13495 = vmul.f32 %v13298, %v13298
  %v13496 = vmul.f32 %v13299, %v13299
  %v13497 = vmul.f32 %v13300, %v13300
  %v13498 = vmul.f32 %v13301, %v13301
  %v13499 = vmul.f32 %v13302, %v13302
  %v13500 = vmul.f32 %v13303, %v13303
  %v13501 = vmul.f32 %v13304, %v13304
  %v13502 = vmul.f32 %v13305, %v13305
  %v13503 = vmul.f32 %v13306, %v13306
  %v13504 = vmul.f32 %v13307, %v13307
  %v13505 = vmul.f32 %v13308, %v13308
  %v13506 = vmul.f32 %v13309, %v13309
  %v13507 = vmul.f32 %v13310, %v13310
  %v13508 = vmul.f32 %v13311, %v13311
  %v13509 = vmul.f32 %v13312, %v13312
  %v13510 = vmul.f32 %v13313, %v13313
  %v13511 = vmul.f32 %v13314, %v13314
  %v13512 = vmul.f32 %v13315, %v13315
  %v13513 = vmul.f32 %v13316, %v13316
  %v13514 = vmul.f32 %v13317, %v13317
  %v13515 = vmul.f32 %v13318, %v13318
  %v13516 = vmul.f32 %v13319, %v13319
  %v13517 = vmul.f32 %v13320, %v13320
  %v13518 = vmul.f32 %v13321, %v13321
  %v13519 = vmul.f32 %v13322, %v13322
  %v13520 = vmul.f32 %v13323, %v13323
  %v13521 = vmul.f32 %v13324, %v13324
  %v13522 = vmul.f32 %v13325, %v13325
  %v13523 = vmul.f32 %v13326, %v13326
  %v13524 = vmul.f32 %v13327, %v13327
  %v13525 = vmul.f32 %v13328, %v13328
  %v13526 = vmul.f32 %v13329, %v13329
  %v13527 = vmul.f32 %v13330, %v13330
  %v13528 = vmul.f32 %v13331, %v13331
  %v13529 = vmul.f32 %v13332, %v13332
  %v13530 = vmul.f32 %v13333, %v13333
  %v13531 = vmul.f32 %v13334, %v13334
  %v13532 = vmul.f32 %v13335, %v13335
  %v13533 = vmul.f32 %v13336, %v13336
  %v13534 = vmul.f32 %v13337, %v13337
  %v13535 = vmul.f32 %v13338, %v13338
  %v13536 = vmul.f32 %v13339, %v13339
  %v13537 = vmul.f32 %v13340, %v13340
  %v13538 = vmul.f32 %v13341, %v13341
  %v13539 = vmul.f32 %v13342, %v13342
  %v13540 = vmul.f32 %v13343, %v13343
  %v13541 = vmul.f32 %v13344, %v13344
  %v13542 = vmul.f32 %v13345, %v13345
  %v13543 = vmul.f32 %v13346, %v13346
  %v13544 = vmul.f32 %v13347, %v13347
  %v13545 = vmul.f32 %v13348, %v13348
  %v13546 = vmul.f32 %v13349, %v13349
  %v13547 = vmul.f32 %v13350, %v13350
  %v13548 = vmul.f32 %v13351, %v13351
  %v13549 = vmul.f32 %v13352, %v13352
  %v13550 = vmul.f32 %v13353, %v13353
  %v13551 = vmul.f32 %v13354, %v13354
  %v13552 = vmul.f32 %v13355, %v13355
  %v13553 = vmul.f32 %v13356, %v13356
  %v13554 = vmul.f32 %v13357, %v13357
  %v13555 = vmul.f32 %v13358, %v13358
  %v13556 = vmul.f32 %v13359, %v13359
  %v13557 = vsel %vm44, %v13493, 0.0
  %v13558 = vsel %vm44, %v13494, 0.0
  %v13559 = vadd.f32 %v13557, %v13558
  %v13560 = vsel %vm44, %v13495, 0.0
  %v13561 = vadd.f32 %v13559, %v13560
  %v13562 = vsel %vm44, %v13496, 0.0
  %v13563 = vadd.f32 %v13561, %v13562
  %v13564 = vsel %vm44, %v13497, 0.0
  %v13565 = vadd.f32 %v13563, %v13564
  %v13566 = vsel %vm44, %v13498, 0.0
  %v13567 = vadd.f32 %v13565, %v13566
  %v13568 = vsel %vm44, %v13499, 0.0
  %v13569 = vadd.f32 %v13567, %v13568
  %v13570 = vsel %vm44, %v13500, 0.0
  %v13571 = vadd.f32 %v13569, %v13570
  %v13572 = vsel %vm44, %v13501, 0.0
  %v13573 = vadd.f32 %v13571, %v13572
  %v13574 = vsel %vm44, %v13502, 0.0
  %v13575 = vadd.f32 %v13573, %v13574
  %v13576 = vsel %vm44, %v13503, 0.0
  %v13577 = vadd.f32 %v13575, %v13576
  %v13578 = vsel %vm44, %v13504, 0.0
  %v13579 = vadd.f32 %v13577, %v13578
  %v13580 = vsel %vm44, %v13505, 0.0
  %v13581 = vadd.f32 %v13579, %v13580
  %v13582 = vsel %vm44, %v13506, 0.0
  %v13583 = vadd.f32 %v13581, %v13582
  %v13584 = vsel %vm44, %v13507, 0.0
  %v13585 = vadd.f32 %v13583, %v13584
  %v13586 = vsel %vm44, %v13508, 0.0
  %v13587 = vadd.f32 %v13585, %v13586
  %v13588 = vsel %vm44, %v13509, 0.0
  %v13589 = vadd.f32 %v13587, %v13588
  %v13590 = vsel %vm44, %v13510, 0.0
  %v13591 = vadd.f32 %v13589, %v13590
  %v13592 = vsel %vm44, %v13511, 0.0
  %v13593 = vadd.f32 %v13591, %v13592
  %v13594 = vsel %vm44, %v13512, 0.0
  %v13595 = vadd.f32 %v13593, %v13594
  %v13596 = vsel %vm44, %v13513, 0.0
  %v13597 = vadd.f32 %v13595, %v13596
  %v13598 = vsel %vm44, %v13514, 0.0
  %v13599 = vadd.f32 %v13597, %v13598
  %v13600 = vsel %vm44, %v13515, 0.0
  %v13601 = vadd.f32 %v13599, %v13600
  %v13602 = vsel %vm44, %v13516, 0.0
  %v13603 = vadd.f32 %v13601, %v13602
  %v13604 = vsel %vm44, %v13517, 0.0
  %v13605 = vadd.f32 %v13603, %v13604
  %v13606 = vsel %vm44, %v13518, 0.0
  %v13607 = vadd.f32 %v13605, %v13606
  %v13608 = vsel %vm44, %v13519, 0.0
  %v13609 = vadd.f32 %v13607, %v13608
  %v13610 = vsel %vm44, %v13520, 0.0
  %v13611 = vadd.f32 %v13609, %v13610
  %v13612 = vsel %vm44, %v13521, 0.0
  %v13613 = vadd.f32 %v13611, %v13612
  %v13614 = vsel %vm44, %v13522, 0.0
  %v13615 = vadd.f32 %v13613, %v13614
  %v13616 = vsel %vm44, %v13523, 0.0
  %v13617 = vadd.f32 %v13615, %v13616
  %v13618 = vsel %vm44, %v13524, 0.0
  %v13619 = vadd.f32 %v13617, %v13618
  %v13620 = vsel %vm44, %v13525, 0.0
  %v13621 = vadd.f32 %v13619, %v13620
  %v13622 = vsel %vm44, %v13526, 0.0
  %v13623 = vadd.f32 %v13621, %v13622
  %v13624 = vsel %vm44, %v13527, 0.0
  %v13625 = vadd.f32 %v13623, %v13624
  %v13626 = vsel %vm44, %v13528, 0.0
  %v13627 = vadd.f32 %v13625, %v13626
  %v13628 = vsel %vm44, %v13529, 0.0
  %v13629 = vadd.f32 %v13627, %v13628
  %v13630 = vsel %vm44, %v13530, 0.0
  %v13631 = vadd.f32 %v13629, %v13630
  %v13632 = vsel %vm44, %v13531, 0.0
  %v13633 = vadd.f32 %v13631, %v13632
  %v13634 = vsel %vm44, %v13532, 0.0
  %v13635 = vadd.f32 %v13633, %v13634
  %v13636 = vsel %vm44, %v13533, 0.0
  %v13637 = vadd.f32 %v13635, %v13636
  %v13638 = vsel %vm44, %v13534, 0.0
  %v13639 = vadd.f32 %v13637, %v13638
  %v13640 = vsel %vm44, %v13535, 0.0
  %v13641 = vadd.f32 %v13639, %v13640
  %v13642 = vsel %vm44, %v13536, 0.0
  %v13643 = vadd.f32 %v13641, %v13642
  %v13644 = vsel %vm44, %v13537, 0.0
  %v13645 = vadd.f32 %v13643, %v13644
  %v13646 = vsel %vm44, %v13538, 0.0
  %v13647 = vadd.f32 %v13645, %v13646
  %v13648 = vsel %vm44, %v13539, 0.0
  %v13649 = vadd.f32 %v13647, %v13648
  %v13650 = vsel %vm44, %v13540, 0.0
  %v13651 = vadd.f32 %v13649, %v13650
  %v13652 = vsel %vm44, %v13541, 0.0
  %v13653 = vadd.f32 %v13651, %v13652
  %v13654 = vsel %vm44, %v13542, 0.0
  %v13655 = vadd.f32 %v13653, %v13654
  %v13656 = vsel %vm44, %v13543, 0.0
  %v13657 = vadd.f32 %v13655, %v13656
  %v13658 = vsel %vm44, %v13544, 0.0
  %v13659 = vadd.f32 %v13657, %v13658
  %v13660 = vsel %vm44, %v13545, 0.0
  %v13661 = vadd.f32 %v13659, %v13660
  %v13662 = vsel %vm44, %v13546, 0.0
  %v13663 = vadd.f32 %v13661, %v13662
  %v13664 = vsel %vm44, %v13547, 0.0
  %v13665 = vadd.f32 %v13663, %v13664
  %v13666 = vsel %vm44, %v13548, 0.0
  %v13667 = vadd.f32 %v13665, %v13666
  %v13668 = vsel %vm44, %v13549, 0.0
  %v13669 = vadd.f32 %v13667, %v13668
  %v13670 = vsel %vm44, %v13550, 0.0
  %v13671 = vadd.f32 %v13669, %v13670
  %v13672 = vsel %vm44, %v13551, 0.0
  %v13673 = vadd.f32 %v13671, %v13672
  %v13674 = vsel %vm44, %v13552, 0.0
  %v13675 = vadd.f32 %v13673, %v13674
  %v13676 = vsel %vm44, %v13553, 0.0
  %v13677 = vadd.f32 %v13675, %v13676
  %v13678 = vsel %vm44, %v13554, 0.0
  %v13679 = vadd.f32 %v13677, %v13678
  %v13680 = vsel %vm44, %v13555, 0.0
  %v13681 = vadd.f32 %v13679, %v13680
  %v13682 = vsel %vm44, %v13556, 0.0
  %v13683 = vadd.f32 %v13681, %v13682
  %v13684 = vrot.slane %v13683, 4
  %v13685 = vadd.f32 %v13683, %v13684
  %v13686 = vrot.slane %v13685, 2
  %v13687 = vadd.f32 %v13685, %v13686
  %v13688 = vrot.slane %v13687, 1
  %v13689 = vadd.f32 %v13687, %v13688
  %v13690 = vmul.f32 %v13492, 0.001953125
  %v13691 = vmul.f32 %v13689, 0.001953125
  %v13692 = vmul.f32 %v13690, %v13690
  %v13693 = vsub.f32 %v13691, %v13692
  %v13694 = vld [vmem:[%s5] sm:$0x1]
  %v13695 = vadd.f32 %v13693, 1e-05
  %v13696 = vrsqrt.pop %v13695
  %v13697 = vmul.f32 %v13694, %v13696
  %v13698 = vld [vmem:[%s6] sm:$0x1]
  %v13699 = vmul.f32 %v13690, %v13697
  %v13700 = vsub.f32 %v13698, %v13699
  %v13701 = vld [vmem:[%s0] sm:$0xff]
  %v13702 = vld [vmem:[%s0 + $0x8] sm:$0xff]
  %v13703 = vld [vmem:[%s0 + $0x10] sm:$0xff]
  %v13704 = vld [vmem:[%s0 + $0x18] sm:$0xff]
  %v13705 = vld [vmem:[%s0 + $0x20] sm:$0xff]
  %v13706 = vld [vmem:[%s0 + $0x28] sm:$0xff]
  %v13707 = vld [vmem:[%s0 + $0x30] sm:$0xff]
  %v13708 = vld [vmem:[%s0 + $0x38] sm:$0xff]
  %v13709 = vld [vmem:[%s0 + $0x40] sm:$0xff]
  %v13710 = vld [vmem:[%s0 + $0x48] sm:$0xff]
  %v13711 = vld [vmem:[%s0 + $0x50] sm:$0xff]
  %v13712 = vld [vmem:[%s0 + $0x58] sm:$0xff]
  %v13713 = vld [vmem:[%s0 + $0x60] sm:$0xff]
  %v13714 = vld [vmem:[%s0 + $0x68] sm:$0xff]
  %v13715 = vld [vmem:[%s0 + $0x70] sm:$0xff]
  %v13716 = vld [vmem:[%s0 + $0x78] sm:$0xff]
  %v13717 = vld [vmem:[%s0 + $0x80] sm:$0xff]
  %v13718 = vld [vmem:[%s0 + $0x88] sm:$0xff]
  %v13719 = vld [vmem:[%s0 + $0x90] sm:$0xff]
  %v13720 = vld [vmem:[%s0 + $0x98] sm:$0xff]
  %v13721 = vld [vmem:[%s0 + $0xa0] sm:$0xff]
  %v13722 = vld [vmem:[%s0 + $0xa8] sm:$0xff]
  %v13723 = vld [vmem:[%s0 + $0xb0] sm:$0xff]
  %v13724 = vld [vmem:[%s0 + $0xb8] sm:$0xff]
  %v13725 = vld [vmem:[%s0 + $0xc0] sm:$0xff]
  %v13726 = vld [vmem:[%s0 + $0xc8] sm:$0xff]
  %v13727 = vld [vmem:[%s0 + $0xd0] sm:$0xff]
  %v13728 = vld [vmem:[%s0 + $0xd8] sm:$0xff]
  %v13729 = vld [vmem:[%s0 + $0xe0] sm:$0xff]
  %v13730 = vld [vmem:[%s0 + $0xe8] sm:$0xff]
  %v13731 = vld [vmem:[%s0 + $0xf0] sm:$0xff]
  %v13732 = vld [vmem:[%s0 + $0xf8] sm:$0xff]
  %v13733 = vld [vmem:[%s0 + $0x100] sm:$0xff]
  %v13734 = vld [vmem:[%s0 + $0x108] sm:$0xff]
  %v13735 = vld [vmem:[%s0 + $0x110] sm:$0xff]
  %v13736 = vld [vmem:[%s0 + $0x118] sm:$0xff]
  %v13737 = vld [vmem:[%s0 + $0x120] sm:$0xff]
  %v13738 = vld [vmem:[%s0 + $0x128] sm:$0xff]
  %v13739 = vld [vmem:[%s0 + $0x130] sm:$0xff]
  %v13740 = vld [vmem:[%s0 + $0x138] sm:$0xff]
  %v13741 = vld [vmem:[%s0 + $0x140] sm:$0xff]
  %v13742 = vld [vmem:[%s0 + $0x148] sm:$0xff]
  %v13743 = vld [vmem:[%s0 + $0x150] sm:$0xff]
  %v13744 = vld [vmem:[%s0 + $0x158] sm:$0xff]
  %v13745 = vld [vmem:[%s0 + $0x160] sm:$0xff]
  %v13746 = vld [vmem:[%s0 + $0x168] sm:$0xff]
  %v13747 = vld [vmem:[%s0 + $0x170] sm:$0xff]
  %v13748 = vld [vmem:[%s0 + $0x178] sm:$0xff]
  %v13749 = vld [vmem:[%s0 + $0x180] sm:$0xff]
  %v13750 = vld [vmem:[%s0 + $0x188] sm:$0xff]
  %v13751 = vld [vmem:[%s0 + $0x190] sm:$0xff]
  %v13752 = vld [vmem:[%s0 + $0x198] sm:$0xff]
  %v13753 = vld [vmem:[%s0 + $0x1a0] sm:$0xff]
  %v13754 = vld [vmem:[%s0 + $0x1a8] sm:$0xff]
  %v13755 = vld [vmem:[%s0 + $0x1b0] sm:$0xff]
  %v13756 = vld [vmem:[%s0 + $0x1b8] sm:$0xff]
  %v13757 = vld [vmem:[%s0 + $0x1c0] sm:$0xff]
  %v13758 = vld [vmem:[%s0 + $0x1c8] sm:$0xff]
  %v13759 = vld [vmem:[%s0 + $0x1d0] sm:$0xff]
  %v13760 = vld [vmem:[%s0 + $0x1d8] sm:$0xff]
  %v13761 = vld [vmem:[%s0 + $0x1e0] sm:$0xff]
  %v13762 = vld [vmem:[%s0 + $0x1e8] sm:$0xff]
  %v13763 = vld [vmem:[%s0 + $0x1f0] sm:$0xff]
  %v13764 = vld [vmem:[%s0 + $0x1f8] sm:$0xff]
  %v13766 = vlaneseq
  %v13767 = vshrl.u32 %v13766, 7
  %v13768 = vsub.s32 0, %v13767
  %v13769 = vrot.slane %v13697, %v13768
  %v13771 = vmul.f32 %v13296, %v13769
  %v13772 = vmul.f32 %v13297, %v13769
  %v13773 = vmul.f32 %v13298, %v13769
  %v13774 = vmul.f32 %v13299, %v13769
  %v13775 = vmul.f32 %v13300, %v13769
  %v13776 = vmul.f32 %v13301, %v13769
  %v13777 = vmul.f32 %v13302, %v13769
  %v13778 = vmul.f32 %v13303, %v13769
  %v13779 = vmul.f32 %v13304, %v13769
  %v13780 = vmul.f32 %v13305, %v13769
  %v13781 = vmul.f32 %v13306, %v13769
  %v13782 = vmul.f32 %v13307, %v13769
  %v13783 = vmul.f32 %v13308, %v13769
  %v13784 = vmul.f32 %v13309, %v13769
  %v13785 = vmul.f32 %v13310, %v13769
  %v13786 = vmul.f32 %v13311, %v13769
  %v13787 = vmul.f32 %v13312, %v13769
  %v13788 = vmul.f32 %v13313, %v13769
  %v13789 = vmul.f32 %v13314, %v13769
  %v13790 = vmul.f32 %v13315, %v13769
  %v13791 = vmul.f32 %v13316, %v13769
  %v13792 = vmul.f32 %v13317, %v13769
  %v13793 = vmul.f32 %v13318, %v13769
  %v13794 = vmul.f32 %v13319, %v13769
  %v13795 = vmul.f32 %v13320, %v13769
  %v13796 = vmul.f32 %v13321, %v13769
  %v13797 = vmul.f32 %v13322, %v13769
  %v13798 = vmul.f32 %v13323, %v13769
  %v13799 = vmul.f32 %v13324, %v13769
  %v13800 = vmul.f32 %v13325, %v13769
  %v13801 = vmul.f32 %v13326, %v13769
  %v13802 = vmul.f32 %v13327, %v13769
  %v13803 = vmul.f32 %v13328, %v13769
  %v13804 = vmul.f32 %v13329, %v13769
  %v13805 = vmul.f32 %v13330, %v13769
  %v13806 = vmul.f32 %v13331, %v13769
  %v13807 = vmul.f32 %v13332, %v13769
  %v13808 = vmul.f32 %v13333, %v13769
  %v13809 = vmul.f32 %v13334, %v13769
  %v13810 = vmul.f32 %v13335, %v13769
  %v13811 = vmul.f32 %v13336, %v13769
  %v13812 = vmul.f32 %v13337, %v13769
  %v13813 = vmul.f32 %v13338, %v13769
  %v13814 = vmul.f32 %v13339, %v13769
  %v13815 = vmul.f32 %v13340, %v13769
  %v13816 = vmul.f32 %v13341, %v13769
  %v13817 = vmul.f32 %v13342, %v13769
  %v13818 = vmul.f32 %v13343, %v13769
  %v13819 = vmul.f32 %v13344, %v13769
  %v13820 = vmul.f32 %v13345, %v13769
  %v13821 = vmul.f32 %v13346, %v13769
  %v13822 = vmul.f32 %v13347, %v13769
  %v13823 = vmul.f32 %v13348, %v13769
  %v13824 = vmul.f32 %v13349, %v13769
  %v13825 = vmul.f32 %v13350, %v13769
  %v13826 = vmul.f32 %v13351, %v13769
  %v13827 = vmul.f32 %v13352, %v13769
  %v13828 = vmul.f32 %v13353, %v13769
  %v13829 = vmul.f32 %v13354, %v13769
  %v13830 = vmul.f32 %v13355, %v13769
  %v13831 = vmul.f32 %v13356, %v13769
  %v13832 = vmul.f32 %v13357, %v13769
  %v13833 = vmul.f32 %v13358, %v13769
  %v13834 = vmul.f32 %v13359, %v13769
  %v13836 = vlaneseq
  %v13837 = vshrl.u32 %v13836, 7
  %v13838 = vsub.s32 0, %v13837
  %v13839 = vrot.slane %v13700, %v13838
  %v13841 = vadd.f32 %v13771, %v13839
  %v13842 = vadd.f32 %v13772, %v13839
  %v13843 = vadd.f32 %v13773, %v13839
  %v13844 = vadd.f32 %v13774, %v13839
  %v13845 = vadd.f32 %v13775, %v13839
  %v13846 = vadd.f32 %v13776, %v13839
  %v13847 = vadd.f32 %v13777, %v13839
  %v13848 = vadd.f32 %v13778, %v13839
  %v13849 = vadd.f32 %v13779, %v13839
  %v13850 = vadd.f32 %v13780, %v13839
  %v13851 = vadd.f32 %v13781, %v13839
  %v13852 = vadd.f32 %v13782, %v13839
  %v13853 = vadd.f32 %v13783, %v13839
  %v13854 = vadd.f32 %v13784, %v13839
  %v13855 = vadd.f32 %v13785, %v13839
  %v13856 = vadd.f32 %v13786, %v13839
  %v13857 = vadd.f32 %v13787, %v13839
  %v13858 = vadd.f32 %v13788, %v13839
  %v13859 = vadd.f32 %v13789, %v13839
  %v13860 = vadd.f32 %v13790, %v13839
  %v13861 = vadd.f32 %v13791, %v13839
  %v13862 = vadd.f32 %v13792, %v13839
  %v13863 = vadd.f32 %v13793, %v13839
  %v13864 = vadd.f32 %v13794, %v13839
  %v13865 = vadd.f32 %v13795, %v13839
  %v13866 = vadd.f32 %v13796, %v13839
  %v13867 = vadd.f32 %v13797, %v13839
  %v13868 = vadd.f32 %v13798, %v13839
  %v13869 = vadd.f32 %v13799, %v13839
  %v13870 = vadd.f32 %v13800, %v13839
  %v13871 = vadd.f32 %v13801, %v13839
  %v13872 = vadd.f32 %v13802, %v13839
  %v13873 = vadd.f32 %v13803, %v13839
  %v13874 = vadd.f32 %v13804, %v13839
  %v13875 = vadd.f32 %v13805, %v13839
  %v13876 = vadd.f32 %v13806, %v13839
  %v13877 = vadd.f32 %v13807, %v13839
  %v13878 = vadd.f32 %v13808, %v13839
  %v13879 = vadd.f32 %v13809, %v13839
  %v13880 = vadd.f32 %v13810, %v13839
  %v13881 = vadd.f32 %v13811, %v13839
  %v13882 = vadd.f32 %v13812, %v13839
  %v13883 = vadd.f32 %v13813, %v13839
  %v13884 = vadd.f32 %v13814, %v13839
  %v13885 = vadd.f32 %v13815, %v13839
  %v13886 = vadd.f32 %v13816, %v13839
  %v13887 = vadd.f32 %v13817, %v13839
  %v13888 = vadd.f32 %v13818, %v13839
  %v13889 = vadd.f32 %v13819, %v13839
  %v13890 = vadd.f32 %v13820, %v13839
  %v13891 = vadd.f32 %v13821, %v13839
  %v13892 = vadd.f32 %v13822, %v13839
  %v13893 = vadd.f32 %v13823, %v13839
  %v13894 = vadd.f32 %v13824, %v13839
  %v13895 = vadd.f32 %v13825, %v13839
  %v13896 = vadd.f32 %v13826, %v13839
  %v13897 = vadd.f32 %v13827, %v13839
  %v13898 = vadd.f32 %v13828, %v13839
  %v13899 = vadd.f32 %v13829, %v13839
  %v13900 = vadd.f32 %v13830, %v13839
  %v13901 = vadd.f32 %v13831, %v13839
  %v13902 = vadd.f32 %v13832, %v13839
  %v13903 = vadd.f32 %v13833, %v13839
  %v13904 = vadd.f32 %v13834, %v13839
  %v13905 = vadd.f32 %v13841, %v13701
  %v13906 = vadd.f32 %v13842, %v13702
  %v13907 = vadd.f32 %v13843, %v13703
  %v13908 = vadd.f32 %v13844, %v13704
  %v13909 = vadd.f32 %v13845, %v13705
  %v13910 = vadd.f32 %v13846, %v13706
  %v13911 = vadd.f32 %v13847, %v13707
  %v13912 = vadd.f32 %v13848, %v13708
  %v13913 = vadd.f32 %v13849, %v13709
  %v13914 = vadd.f32 %v13850, %v13710
  %v13915 = vadd.f32 %v13851, %v13711
  %v13916 = vadd.f32 %v13852, %v13712
  %v13917 = vadd.f32 %v13853, %v13713
  %v13918 = vadd.f32 %v13854, %v13714
  %v13919 = vadd.f32 %v13855, %v13715
  %v13920 = vadd.f32 %v13856, %v13716
  %v13921 = vadd.f32 %v13857, %v13717
  %v13922 = vadd.f32 %v13858, %v13718
  %v13923 = vadd.f32 %v13859, %v13719
  %v13924 = vadd.f32 %v13860, %v13720
  %v13925 = vadd.f32 %v13861, %v13721
  %v13926 = vadd.f32 %v13862, %v13722
  %v13927 = vadd.f32 %v13863, %v13723
  %v13928 = vadd.f32 %v13864, %v13724
  %v13929 = vadd.f32 %v13865, %v13725
  %v13930 = vadd.f32 %v13866, %v13726
  %v13931 = vadd.f32 %v13867, %v13727
  %v13932 = vadd.f32 %v13868, %v13728
  %v13933 = vadd.f32 %v13869, %v13729
  %v13934 = vadd.f32 %v13870, %v13730
  %v13935 = vadd.f32 %v13871, %v13731
  %v13936 = vadd.f32 %v13872, %v13732
  %v13937 = vadd.f32 %v13873, %v13733
  %v13938 = vadd.f32 %v13874, %v13734
  %v13939 = vadd.f32 %v13875, %v13735
  %v13940 = vadd.f32 %v13876, %v13736
  %v13941 = vadd.f32 %v13877, %v13737
  %v13942 = vadd.f32 %v13878, %v13738
  %v13943 = vadd.f32 %v13879, %v13739
  %v13944 = vadd.f32 %v13880, %v13740
  %v13945 = vadd.f32 %v13881, %v13741
  %v13946 = vadd.f32 %v13882, %v13742
  %v13947 = vadd.f32 %v13883, %v13743
  %v13948 = vadd.f32 %v13884, %v13744
  %v13949 = vadd.f32 %v13885, %v13745
  %v13950 = vadd.f32 %v13886, %v13746
  %v13951 = vadd.f32 %v13887, %v13747
  %v13952 = vadd.f32 %v13888, %v13748
  %v13953 = vadd.f32 %v13889, %v13749
  %v13954 = vadd.f32 %v13890, %v13750
  %v13955 = vadd.f32 %v13891, %v13751
  %v13956 = vadd.f32 %v13892, %v13752
  %v13957 = vadd.f32 %v13893, %v13753
  %v13958 = vadd.f32 %v13894, %v13754
  %v13959 = vadd.f32 %v13895, %v13755
  %v13960 = vadd.f32 %v13896, %v13756
  %v13961 = vadd.f32 %v13897, %v13757
  %v13962 = vadd.f32 %v13898, %v13758
  %v13963 = vadd.f32 %v13899, %v13759
  %v13964 = vadd.f32 %v13900, %v13760
  %v13965 = vadd.f32 %v13901, %v13761
  %v13966 = vadd.f32 %v13902, %v13762
  %v13967 = vadd.f32 %v13903, %v13763
  %v13968 = vadd.f32 %v13904, %v13764
  %v13969 = vmax.f32 %v13905, 0.0
  %v13970 = vmax.f32 %v13906, 0.0
  %v13971 = vmax.f32 %v13907, 0.0
  %v13972 = vmax.f32 %v13908, 0.0
  %v13973 = vmax.f32 %v13909, 0.0
  %v13974 = vmax.f32 %v13910, 0.0
  %v13975 = vmax.f32 %v13911, 0.0
  %v13976 = vmax.f32 %v13912, 0.0
  %v13977 = vmax.f32 %v13913, 0.0
  %v13978 = vmax.f32 %v13914, 0.0
  %v13979 = vmax.f32 %v13915, 0.0
  %v13980 = vmax.f32 %v13916, 0.0
  %v13981 = vmax.f32 %v13917, 0.0
  %v13982 = vmax.f32 %v13918, 0.0
  %v13983 = vmax.f32 %v13919, 0.0
  %v13984 = vmax.f32 %v13920, 0.0
  %v13985 = vmax.f32 %v13921, 0.0
  %v13986 = vmax.f32 %v13922, 0.0
  %v13987 = vmax.f32 %v13923, 0.0
  %v13988 = vmax.f32 %v13924, 0.0
  %v13989 = vmax.f32 %v13925, 0.0
  %v13990 = vmax.f32 %v13926, 0.0
  %v13991 = vmax.f32 %v13927, 0.0
  %v13992 = vmax.f32 %v13928, 0.0
  %v13993 = vmax.f32 %v13929, 0.0
  %v13994 = vmax.f32 %v13930, 0.0
  %v13995 = vmax.f32 %v13931, 0.0
  %v13996 = vmax.f32 %v13932, 0.0
  %v13997 = vmax.f32 %v13933, 0.0
  %v13998 = vmax.f32 %v13934, 0.0
  %v13999 = vmax.f32 %v13935, 0.0
  %v14000 = vmax.f32 %v13936, 0.0
  %v14001 = vmax.f32 %v13937, 0.0
  %v14002 = vmax.f32 %v13938, 0.0
  %v14003 = vmax.f32 %v13939, 0.0
  %v14004 = vmax.f32 %v13940, 0.0
  %v14005 = vmax.f32 %v13941, 0.0
  %v14006 = vmax.f32 %v13942, 0.0
  %v14007 = vmax.f32 %v13943, 0.0
  %v14008 = vmax.f32 %v13944, 0.0
  %v14009 = vmax.f32 %v13945, 0.0
  %v14010 = vmax.f32 %v13946, 0.0
  %v14011 = vmax.f32 %v13947, 0.0
  %v14012 = vmax.f32 %v13948, 0.0
  %v14013 = vmax.f32 %v13949, 0.0
  %v14014 = vmax.f32 %v13950, 0.0
  %v14015 = vmax.f32 %v13951, 0.0
  %v14016 = vmax.f32 %v13952, 0.0
  %v14017 = vmax.f32 %v13953, 0.0
  %v14018 = vmax.f32 %v13954, 0.0
  %v14019 = vmax.f32 %v13955, 0.0
  %v14020 = vmax.f32 %v13956, 0.0
  %v14021 = vmax.f32 %v13957, 0.0
  %v14022 = vmax.f32 %v13958, 0.0
  %v14023 = vmax.f32 %v13959, 0.0
  %v14024 = vmax.f32 %v13960, 0.0
  %v14025 = vmax.f32 %v13961, 0.0
  %v14026 = vmax.f32 %v13962, 0.0
  %v14027 = vmax.f32 %v13963, 0.0
  %v14028 = vmax.f32 %v13964, 0.0
  %v14029 = vmax.f32 %v13965, 0.0
  %v14030 = vmax.f32 %v13966, 0.0
  %v14031 = vmax.f32 %v13967, 0.0
  %v14032 = vmax.f32 %v13968, 0.0
  %14033 = vst.msk [vmem:[%s7] sm:$0xff] %vm44, %v13969
  %14034 = vst.msk [vmem:[%s7 + $0x8] sm:$0xff] %vm44, %v13970
  %14035 = vst.msk [vmem:[%s7 + $0x10] sm:$0xff] %vm44, %v13971
  %14036 = vst.msk [vmem:[%s7 + $0x18] sm:$0xff] %vm44, %v13972
  %14037 = vst.msk [vmem:[%s7 + $0x20] sm:$0xff] %vm44, %v13973
  %14038 = vst.msk [vmem:[%s7 + $0x28] sm:$0xff] %vm44, %v13974
  %14039 = vst.msk [vmem:[%s7 + $0x30] sm:$0xff] %vm44, %v13975
  %14040 = vst.msk [vmem:[%s7 + $0x38] sm:$0xff] %vm44, %v13976
  %14041 = vst.msk [vmem:[%s7 + $0x40] sm:$0xff] %vm44, %v13977
  %14042 = vst.msk [vmem:[%s7 + $0x48] sm:$0xff] %vm44, %v13978
  %14043 = vst.msk [vmem:[%s7 + $0x50] sm:$0xff] %vm44, %v13979
  %14044 = vst.msk [vmem:[%s7 + $0x58] sm:$0xff] %vm44, %v13980
  %14045 = vst.msk [vmem:[%s7 + $0x60] sm:$0xff] %vm44, %v13981
  %14046 = vst.msk [vmem:[%s7 + $0x68] sm:$0xff] %vm44, %v13982
  %14047 = vst.msk [vmem:[%s7 + $0x70] sm:$0xff] %vm44, %v13983
  %14048 = vst.msk [vmem:[%s7 + $0x78] sm:$0xff] %vm44, %v13984
  %14049 = vst.msk [vmem:[%s7 + $0x80] sm:$0xff] %vm44, %v13985
  %14050 = vst.msk [vmem:[%s7 + $0x88] sm:$0xff] %vm44, %v13986
  %14051 = vst.msk [vmem:[%s7 + $0x90] sm:$0xff] %vm44, %v13987
  %14052 = vst.msk [vmem:[%s7 + $0x98] sm:$0xff] %vm44, %v13988
  %14053 = vst.msk [vmem:[%s7 + $0xa0] sm:$0xff] %vm44, %v13989
  %14054 = vst.msk [vmem:[%s7 + $0xa8] sm:$0xff] %vm44, %v13990
  %14055 = vst.msk [vmem:[%s7 + $0xb0] sm:$0xff] %vm44, %v13991
  %14056 = vst.msk [vmem:[%s7 + $0xb8] sm:$0xff] %vm44, %v13992
  %14057 = vst.msk [vmem:[%s7 + $0xc0] sm:$0xff] %vm44, %v13993
  %14058 = vst.msk [vmem:[%s7 + $0xc8] sm:$0xff] %vm44, %v13994
  %14059 = vst.msk [vmem:[%s7 + $0xd0] sm:$0xff] %vm44, %v13995
  %14060 = vst.msk [vmem:[%s7 + $0xd8] sm:$0xff] %vm44, %v13996
  %14061 = vst.msk [vmem:[%s7 + $0xe0] sm:$0xff] %vm44, %v13997
  %14062 = vst.msk [vmem:[%s7 + $0xe8] sm:$0xff] %vm44, %v13998
  %14063 = vst.msk [vmem:[%s7 + $0xf0] sm:$0xff] %vm44, %v13999
  %14064 = vst.msk [vmem:[%s7 + $0xf8] sm:$0xff] %vm44, %v14000
  %14065 = vst.msk [vmem:[%s7 + $0x100] sm:$0xff] %vm44, %v14001
  %14066 = vst.msk [vmem:[%s7 + $0x108] sm:$0xff] %vm44, %v14002
  %14067 = vst.msk [vmem:[%s7 + $0x110] sm:$0xff] %vm44, %v14003
  %14068 = vst.msk [vmem:[%s7 + $0x118] sm:$0xff] %vm44, %v14004
  %14069 = vst.msk [vmem:[%s7 + $0x120] sm:$0xff] %vm44, %v14005
  %14070 = vst.msk [vmem:[%s7 + $0x128] sm:$0xff] %vm44, %v14006
  %14071 = vst.msk [vmem:[%s7 + $0x130] sm:$0xff] %vm44, %v14007
  %14072 = vst.msk [vmem:[%s7 + $0x138] sm:$0xff] %vm44, %v14008
  %14073 = vst.msk [vmem:[%s7 + $0x140] sm:$0xff] %vm44, %v14009
  %14074 = vst.msk [vmem:[%s7 + $0x148] sm:$0xff] %vm44, %v14010
  %14075 = vst.msk [vmem:[%s7 + $0x150] sm:$0xff] %vm44, %v14011
  %14076 = vst.msk [vmem:[%s7 + $0x158] sm:$0xff] %vm44, %v14012
  %14077 = vst.msk [vmem:[%s7 + $0x160] sm:$0xff] %vm44, %v14013
  %14078 = vst.msk [vmem:[%s7 + $0x168] sm:$0xff] %vm44, %v14014
  %14079 = vst.msk [vmem:[%s7 + $0x170] sm:$0xff] %vm44, %v14015
  %14080 = vst.msk [vmem:[%s7 + $0x178] sm:$0xff] %vm44, %v14016
  %14081 = vst.msk [vmem:[%s7 + $0x180] sm:$0xff] %vm44, %v14017
  %14082 = vst.msk [vmem:[%s7 + $0x188] sm:$0xff] %vm44, %v14018
  %14083 = vst.msk [vmem:[%s7 + $0x190] sm:$0xff] %vm44, %v14019
  %14084 = vst.msk [vmem:[%s7 + $0x198] sm:$0xff] %vm44, %v14020
  %14085 = vst.msk [vmem:[%s7 + $0x1a0] sm:$0xff] %vm44, %v14021
  %14086 = vst.msk [vmem:[%s7 + $0x1a8] sm:$0xff] %vm44, %v14022
  %14087 = vst.msk [vmem:[%s7 + $0x1b0] sm:$0xff] %vm44, %v14023
  %14088 = vst.msk [vmem:[%s7 + $0x1b8] sm:$0xff] %vm44, %v14024
  %14089 = vst.msk [vmem:[%s7 + $0x1c0] sm:$0xff] %vm44, %v14025
  %14090 = vst.msk [vmem:[%s7 + $0x1c8] sm:$0xff] %vm44, %v14026
  %14091 = vst.msk [vmem:[%s7 + $0x1d0] sm:$0xff] %vm44, %v14027
  %14092 = vst.msk [vmem:[%s7 + $0x1d8] sm:$0xff] %vm44, %v14028
  %14093 = vst.msk [vmem:[%s7 + $0x1e0] sm:$0xff] %vm44, %v14029
  %14094 = vst.msk [vmem:[%s7 + $0x1e8] sm:$0xff] %vm44, %v14030
  %14095 = vst.msk [vmem:[%s7 + $0x1f0] sm:$0xff] %vm44, %v14031
  %14096 = vst.msk [vmem:[%s7 + $0x1f8] sm:$0xff] %vm44, %v14032
  // Predicated region
  $region30: #{basic_block_forward.1} parent=0 // pred_check
    _
  $region31: #{basic_block_forward.1} parent=0 // pred_check_branch
    %14098 = sbr.rel (0) target = $region33
  $region32: #{basic_block_forward.1} parent=0 // pred_region
    _
  $region33: #{basic_block_forward.1} parent=0 // pred_fallthru
    _
  // Predicated region
  $region34: #{basic_block_forward.1} parent=0 // pred_check
    _
  $region35: #{basic_block_forward.1} parent=0 // pred_check_branch
    %14100 = sbr.rel (0) target = $region37
  $region36: #{basic_block_forward.1} parent=0 // pred_region
    _
  $region37: #{basic_block_forward.1} parent=0 // pred_fallthru
    _

</llo_original>
